<compile_context>
chip_gen: v7x
topology: tpu7x:2x2x1
jax: 0.10.0
libtpu: 0.0.40
codegen_flags: <defaults>
</compile_context>

<pallas_src>
import functools

import numpy as np

import jax
import jax.numpy as jnp
from jax.experimental import pallas as pl
from jax.experimental.pallas import tpu as pltpu

LANES = 128  # all channel dims are zero-padded to one full lane group


def _ru(x, m):
    return (x + m - 1) // m * m


# ----------------------------------------------------------------------------
# Fused Pallas kernel: conv1 -> conv2 -> conv3 -> fc, all resident in VMEM.
# Every op in here is a 2-D jnp.dot (MXU), add, max or cast.
# ----------------------------------------------------------------------------
def _encoder_kernel(p1_ref, w1_ref, b1_ref,
                    g2_ref, w2_ref, b2_ref,
                    g3_ref, w3_ref, b3_ref,
                    gfc_ref, wfc_ref, bfc_ref,
                    z_ref):
    f32 = jnp.float32
    bf16 = jnp.bfloat16

    # ---- conv1: im2col patches (built in the wrapper) @ W1, bias, ReLU ----
    h1 = jnp.dot(p1_ref[...], w1_ref[...], preferred_element_type=f32)
    h1 = jnp.maximum(h1 + b1_ref[...], 0.0).astype(bf16)          # (M1, 128)

    # ---- conv2: sum over the 16 taps of (gather @ h1) @ W2_tap ----
    n_taps = g2_ref.shape[0]
    m2 = g2_ref.shape[1]
    acc2 = jnp.zeros((m2, LANES), f32)
    for t in range(n_taps):
        gat = jnp.dot(g2_ref[t], h1, preferred_element_type=f32).astype(bf16)
        acc2 = acc2 + jnp.dot(gat, w2_ref[t], preferred_element_type=f32)
    h2 = jnp.maximum(acc2 + b2_ref[...], 0.0).astype(bf16)        # (M2p, 128)

    # ---- conv3 (output rows are position-major, batch-minor) ----
    m3 = g3_ref.shape[1]
    acc3 = jnp.zeros((m3, LANES), f32)
    for t in range(n_taps):
        gat = jnp.dot(g3_ref[t], h2, preferred_element_type=f32).astype(bf16)
        acc3 = acc3 + jnp.dot(gat, w3_ref[t], preferred_element_type=f32)
    h3 = jnp.maximum(acc3 + b3_ref[...], 0.0).astype(bf16)        # (M3p, 128)

    # ---- fc: sum over the 9 spatial positions of the 3x3 feature map ----
    n_pos = gfc_ref.shape[0]
    mz = gfc_ref.shape[1]
    accz = jnp.zeros((mz, LANES), f32)
    for p in range(n_pos):
        gat = jnp.dot(gfc_ref[p], h3, preferred_element_type=f32).astype(bf16)
        accz = accz + jnp.dot(gat, wfc_ref[p], preferred_element_type=f32)
    z_ref[...] = accz + bfc_ref[...]                              # (Mzp, 128) f32


# ----------------------------------------------------------------------------
# One-time parameter preparation (reorder / pad / cast, gather matrices).
# ----------------------------------------------------------------------------
def _pad2(m, rows, cols):
    r, c = m.shape
    out = jnp.zeros((rows, cols), jnp.float32)
    return out.at[:r, :c].set(m.astype(jnp.float32))


def _pad_bias(b):
    out = jnp.zeros((1, LANES), jnp.float32)
    return out.at[0, : b.shape[0]].set(b.astype(jnp.float32))


def _conv_gather_np(h_in, w_in, batch, pos_major, m_in_rows, m_out_rows):
    """0/1 matrices folding im2col + zero-padding of a k=4,s=2,p=1 conv.

    g[t] @ act  selects, for tap t=(i,j), the input pixel feeding each output
    position (rows outside the image -> all-zero row == zero padding).
    """
    h_out = (h_in - 2) // 2 + 1
    w_out = (w_in - 2) // 2 + 1
    g = np.zeros((16, m_out_rows, m_in_rows), np.float32)
    for i in range(4):
        for j in range(4):
            t = 4 * i + j
            for n in range(batch):
                for ho in range(h_out):
                    for wo in range(w_out):
                        hi, wi = 2 * ho + i - 1, 2 * wo + j - 1
                        if 0 <= hi < h_in and 0 <= wi < w_in:
                            if pos_major:
                                r = (ho * w_out + wo) * batch + n
                            else:
                                r = n * h_out * w_out + ho * w_out + wo
                            c = n * h_in * w_in + hi * w_in + wi
                            g[t, r, c] = 1.0
    return g


def _fc_gather_np(batch, m3_rows, mz_rows):
    """Selects, per spatial position p (of the 3x3 map), the batch rows."""
    g = np.zeros((9, mz_rows, m3_rows), np.float32)
    for p in range(9):
        for n in range(batch):
            g[p, n, p * batch + n] = 1.0
    return g


def init_params(n_latent, key):
    """PyTorch-layout parameters (same convention as the nn.Module)."""
    keys = jax.random.split(key, 8)
    scale = 0.05
    return {
        "w1": jax.random.normal(keys[0], (32, 1, 4, 4), jnp.float32) * scale,
        "b1": jax.random.normal(keys[1], (32,), jnp.float32) * scale,
        "w2": jax.random.normal(keys[2], (64, 32, 4, 4), jnp.float32) * scale,
        "b2": jax.random.normal(keys[3], (64,), jnp.float32) * scale,
        "w3": jax.random.normal(keys[4], (128, 64, 4, 4), jnp.float32) * scale,
        "b3": jax.random.normal(keys[5], (128,), jnp.float32) * scale,
        "wfc": jax.random.normal(keys[6], (n_latent, 128 * 3 * 3), jnp.float32) * scale,
        "bfc": jax.random.normal(keys[7], (n_latent,), jnp.float32) * scale,
    }


def prepare_encoder_consts(params, n_latent, batch):
    """Precompute every kernel-side operand once (weights bf16, gathers bf16)."""
    bf16 = jnp.bfloat16
    m1 = batch * 14 * 14                    # 392 (already a multiple of 8)
    m2 = _ru(batch * 7 * 7, 8)              # conv2 rows, sublane padded
    m3 = _ru(batch * 3 * 3, 8)              # conv3 rows, sublane padded
    mz = _ru(batch, 8)                      # fc output rows, sublane padded

    # conv1 weight: (32,1,4,4) -> (16, 32) -> pad cols to 128
    w1 = _pad2(params["w1"].reshape(32, 16).T, 16, LANES).astype(bf16)
    b1 = _pad_bias(params["b1"])

    def tap_stack(w):  # (Cout, Cin, 4, 4) -> (16, 128, 128) in (kh,kw) tap order
        taps = []
        for i in range(4):
            for j in range(4):
                taps.append(_pad2(w[:, :, i, j].T, LANES, LANES))
        return jnp.stack(taps, 0).astype(bf16)

    w2 = tap_stack(params["w2"])
    b2 = _pad_bias(params["b2"])
    w3 = tap_stack(params["w3"])
    b3 = _pad_bias(params["b3"])

    # fc weight: PyTorch flatten order is (c, h, w); split per spatial position
    wfc4 = params["wfc"].reshape(n_latent, 128, 3, 3)
    fct = []
    for h in range(3):
        for w in range(3):
            fct.append(_pad2(wfc4[:, :, h, w].T, LANES, LANES))
    wfc = jnp.stack(fct, 0).astype(bf16)     # (9, 128, 128), p = h*3 + w
    bfc = _pad_bias(params["bfc"])

    # constant 0/1 gather matrices (im2col + spatial zero-pad folded in)
    g2 = jnp.asarray(_conv_gather_np(14, 14, batch, False, m1, m2), bf16)
    g3 = jnp.asarray(_conv_gather_np(7, 7, batch, True, m2, m3), bf16)
    gfc = jnp.asarray(_fc_gather_np(batch, m3, mz), bf16)

    return dict(w1=w1, b1=b1, g2=g2, w2=w2, b2=b2,
                g3=g3, w3=w3, b3=b3, gfc=gfc, wfc=wfc, bfc=bfc)


# ----------------------------------------------------------------------------
# Jitted forward: input im2col (XLA glue) + one fused pallas_call.
# ----------------------------------------------------------------------------
def _input_patches(x):
    """NCHW (N,1,28,28) -> bf16 (N*14*14, 16) patch matrix, taps in (kh,kw)."""
    n = x.shape[0]
    xh = jnp.transpose(x, (0, 2, 3, 1))                   # NHWC
    xp = jnp.pad(xh, ((0, 0), (1, 1), (1, 1), (0, 0)))    # (N,30,30,1)
    cols = []
    for i in range(4):
        for j in range(4):
            cols.append(xp[:, i:i + 28:2, j:j + 28:2, 0])  # (N,14,14)
    p = jnp.stack(cols, axis=-1)                           # (N,14,14,16)
    return p.reshape(n * 14 * 14, 16).astype(jnp.bfloat16)


@functools.partial(jax.jit, static_argnames=("n_latent",))
def encoder_forward(consts, x, *, n_latent):
    batch = x.shape[0]
    patches = _input_patches(x)
    mz = consts["gfc"].shape[1]
    z_pad = pl.pallas_call(
        _encoder_kernel,
        out_shape=jax.ShapeDtypeStruct((mz, LANES), jnp.float32),
        in_specs=[pl.BlockSpec(memory_space=pltpu.MemorySpace.VMEM)] * 12,
        out_specs=pl.BlockSpec(memory_space=pltpu.MemorySpace.VMEM),
    )(patches,
      consts["w1"], consts["b1"],
      consts["g2"], consts["w2"], consts["b2"],
      consts["g3"], consts["w3"], consts["b3"],
      consts["gfc"], consts["wfc"], consts["bfc"])
    return z_pad[:batch, :n_latent]


# ----------------------------------------------------------------------------
# Pure-JAX reference (weights/input rounded to bf16 to match MXU operands)
# ----------------------------------------------------------------------------
def _ref_forward(params, x):
    r = lambda a: a.astype(jnp.bfloat16).astype(jnp.float32)

    def conv(h, w, b):
        y = jax.lax.conv_general_dilated(
            h, r(w), window_strides=(2, 2), padding=((1, 1), (1, 1)),
            dimension_numbers=("NCHW", "OIHW", "NCHW"))
        return jax.nn.relu(y + b[None, :, None, None])

    h = conv(r(x), params["w1"], params["b1"])
    h = conv(h, params["w2"], params["b2"])
    h = conv(h, params["w3"], params["b3"])
    h = h.reshape(h.shape[0], -1)                           # (c, h, w) flatten
    return h @ r(params["wfc"]).T + params["bfc"][None, :]


if __name__ == "__main__":
    n_latent = 16
    batch = 2

    key = jax.random.PRNGKey(0)
    k_x, k_p = jax.random.split(key)
    x = jax.random.normal(k_x, (batch, 1, 28, 28), jnp.float32)
    params = init_params(n_latent, k_p)

    consts = prepare_encoder_consts(params, n_latent, batch)   # once, at init
    z = encoder_forward(consts, x, n_latent=n_latent)
    z = jax.block_until_ready(z)

    z_ref = _ref_forward(params, x)
    assert z.shape == (batch, n_latent)
    assert jnp.allclose(z, z_ref, atol=1e-2, rtol=1e-1), "mismatch vs reference"

    print("KERNEL_OK")
</pallas_src>

<mosaic_0001>
module attributes {stable_mosaic.version = 11 : i64} {
  func.func @_encoder_kernel(%arg0: memref<392x16xbf16, #tpu.memory_space<vmem>>, %arg1: memref<16x128xbf16, #tpu.memory_space<vmem>>, %arg2: memref<1x128xf32, #tpu.memory_space<vmem>>, %arg3: memref<16x104x392xbf16, #tpu.memory_space<vmem>>, %arg4: memref<16x128x128xbf16, #tpu.memory_space<vmem>>, %arg5: memref<1x128xf32, #tpu.memory_space<vmem>>, %arg6: memref<16x24x104xbf16, #tpu.memory_space<vmem>>, %arg7: memref<16x128x128xbf16, #tpu.memory_space<vmem>>, %arg8: memref<1x128xf32, #tpu.memory_space<vmem>>, %arg9: memref<9x8x24xbf16, #tpu.memory_space<vmem>>, %arg10: memref<9x128x128xbf16, #tpu.memory_space<vmem>>, %arg11: memref<1x128xf32, #tpu.memory_space<vmem>>, %arg12: memref<8x128xf32, #tpu.memory_space<vmem>>) attributes {dimension_semantics = [], scalar_prefetch = 0 : i64, scratch_operands = 0 : i64, tpu.core_type = #tpu.core_type<tc>} {
    %c0 = arith.constant 0 : index
    %c0_0 = arith.constant 0 : index
    %0 = vector.load %arg0[%c0, %c0_0] : memref<392x16xbf16, #tpu.memory_space<vmem>>, vector<392x16xbf16>
    %c0_1 = arith.constant 0 : index
    %c0_2 = arith.constant 0 : index
    %1 = vector.load %arg1[%c0_1, %c0_2] : memref<16x128xbf16, #tpu.memory_space<vmem>>, vector<16x128xbf16>
    %cst = arith.constant dense<0.000000e+00> : vector<392x128xf32>
    %2 = tpu.matmul %0, %1, %cst {dimension_numbers = #tpu.dot_dimension_numbers<[1], [0], [0], [1], [0, 0, 1, 1], [], []>} : vector<392x16xbf16>, vector<16x128xbf16>, vector<392x128xf32> -> vector<392x128xf32>
    %c0_3 = arith.constant 0 : index
    %c0_4 = arith.constant 0 : index
    %3 = vector.load %arg2[%c0_3, %c0_4] : memref<1x128xf32, #tpu.memory_space<vmem>>, vector<1x128xf32>
    %4 = vector.broadcast %3 : vector<1x128xf32> to vector<392x128xf32>
    %5 = arith.addf %2, %4 : vector<392x128xf32>
    %cst_5 = arith.constant 0.000000e+00 : f32
    %6 = vector.broadcast %cst_5 : f32 to vector<392x128xf32>
    %7 = arith.maximumf %5, %6 : vector<392x128xf32>
    %8 = arith.truncf %7 : vector<392x128xf32> to vector<392x128xbf16>
    %cst_6 = arith.constant 0.000000e+00 : f32
    %9 = vector.broadcast %cst_6 : f32 to vector<104x128xf32>
    %c0_7 = arith.constant 0 : index
    %c0_8 = arith.constant 0 : index
    %c0_9 = arith.constant 0 : index
    %10 = vector.load %arg3[%c0_7, %c0_8, %c0_9] : memref<16x104x392xbf16, #tpu.memory_space<vmem>>, vector<1x104x392xbf16>
    %11 = vector.shape_cast %10 : vector<1x104x392xbf16> to vector<104x392xbf16>
    %cst_10 = arith.constant dense<0.000000e+00> : vector<104x128xf32>
    %12 = tpu.matmul %11, %8, %cst_10 {dimension_numbers = #tpu.dot_dimension_numbers<[1], [0], [0], [1], [0, 0, 1, 1], [], []>} : vector<104x392xbf16>, vector<392x128xbf16>, vector<104x128xf32> -> vector<104x128xf32>
    %13 = arith.truncf %12 : vector<104x128xf32> to vector<104x128xbf16>
    %c0_11 = arith.constant 0 : index
    %c0_12 = arith.constant 0 : index
    %c0_13 = arith.constant 0 : index
    %14 = vector.load %arg4[%c0_11, %c0_12, %c0_13] : memref<16x128x128xbf16, #tpu.memory_space<vmem>>, vector<1x128x128xbf16>
    %15 = vector.shape_cast %14 : vector<1x128x128xbf16> to vector<128x128xbf16>
    %cst_14 = arith.constant dense<0.000000e+00> : vector<104x128xf32>
    %16 = tpu.matmul %13, %15, %cst_14 {dimension_numbers = #tpu.dot_dimension_numbers<[1], [0], [0], [1], [0, 0, 1, 1], [], []>} : vector<104x128xbf16>, vector<128x128xbf16>, vector<104x128xf32> -> vector<104x128xf32>
    %17 = arith.addf %9, %16 : vector<104x128xf32>
    %c1 = arith.constant 1 : index
    %c0_15 = arith.constant 0 : index
    %c0_16 = arith.constant 0 : index
    %18 = vector.load %arg3[%c1, %c0_15, %c0_16] : memref<16x104x392xbf16, #tpu.memory_space<vmem>>, vector<1x104x392xbf16>
    %19 = vector.shape_cast %18 : vector<1x104x392xbf16> to vector<104x392xbf16>
    %cst_17 = arith.constant dense<0.000000e+00> : vector<104x128xf32>
    %20 = tpu.matmul %19, %8, %cst_17 {dimension_numbers = #tpu.dot_dimension_numbers<[1], [0], [0], [1], [0, 0, 1, 1], [], []>} : vector<104x392xbf16>, vector<392x128xbf16>, vector<104x128xf32> -> vector<104x128xf32>
    %21 = arith.truncf %20 : vector<104x128xf32> to vector<104x128xbf16>
    %c1_18 = arith.constant 1 : index
    %c0_19 = arith.constant 0 : index
    %c0_20 = arith.constant 0 : index
    %22 = vector.load %arg4[%c1_18, %c0_19, %c0_20] : memref<16x128x128xbf16, #tpu.memory_space<vmem>>, vector<1x128x128xbf16>
    %23 = vector.shape_cast %22 : vector<1x128x128xbf16> to vector<128x128xbf16>
    %cst_21 = arith.constant dense<0.000000e+00> : vector<104x128xf32>
    %24 = tpu.matmul %21, %23, %cst_21 {dimension_numbers = #tpu.dot_dimension_numbers<[1], [0], [0], [1], [0, 0, 1, 1], [], []>} : vector<104x128xbf16>, vector<128x128xbf16>, vector<104x128xf32> -> vector<104x128xf32>
    %25 = arith.addf %17, %24 : vector<104x128xf32>
    %c2 = arith.constant 2 : index
    %c0_22 = arith.constant 0 : index
    %c0_23 = arith.constant 0 : index
    %26 = vector.load %arg3[%c2, %c0_22, %c0_23] : memref<16x104x392xbf16, #tpu.memory_space<vmem>>, vector<1x104x392xbf16>
    %27 = vector.shape_cast %26 : vector<1x104x392xbf16> to vector<104x392xbf16>
    %cst_24 = arith.constant dense<0.000000e+00> : vector<104x128xf32>
    %28 = tpu.matmul %27, %8, %cst_24 {dimension_numbers = #tpu.dot_dimension_numbers<[1], [0], [0], [1], [0, 0, 1, 1], [], []>} : vector<104x392xbf16>, vector<392x128xbf16>, vector<104x128xf32> -> vector<104x128xf32>
    %29 = arith.truncf %28 : vector<104x128xf32> to vector<104x128xbf16>
    %c2_25 = arith.constant 2 : index
    %c0_26 = arith.constant 0 : index
    %c0_27 = arith.constant 0 : index
    %30 = vector.load %arg4[%c2_25, %c0_26, %c0_27] : memref<16x128x128xbf16, #tpu.memory_space<vmem>>, vector<1x128x128xbf16>
    %31 = vector.shape_cast %30 : vector<1x128x128xbf16> to vector<128x128xbf16>
    %cst_28 = arith.constant dense<0.000000e+00> : vector<104x128xf32>
    %32 = tpu.matmul %29, %31, %cst_28 {dimension_numbers = #tpu.dot_dimension_numbers<[1], [0], [0], [1], [0, 0, 1, 1], [], []>} : vector<104x128xbf16>, vector<128x128xbf16>, vector<104x128xf32> -> vector<104x128xf32>
    %33 = arith.addf %25, %32 : vector<104x128xf32>
    %c3 = arith.constant 3 : index
    %c0_29 = arith.constant 0 : index
    %c0_30 = arith.constant 0 : index
    %34 = vector.load %arg3[%c3, %c0_29, %c0_30] : memref<16x104x392xbf16, #tpu.memory_space<vmem>>, vector<1x104x392xbf16>
    %35 = vector.shape_cast %34 : vector<1x104x392xbf16> to vector<104x392xbf16>
    %cst_31 = arith.constant dense<0.000000e+00> : vector<104x128xf32>
    %36 = tpu.matmul %35, %8, %cst_31 {dimension_numbers = #tpu.dot_dimension_numbers<[1], [0], [0], [1], [0, 0, 1, 1], [], []>} : vector<104x392xbf16>, vector<392x128xbf16>, vector<104x128xf32> -> vector<104x128xf32>
    %37 = arith.truncf %36 : vector<104x128xf32> to vector<104x128xbf16>
    %c3_32 = arith.constant 3 : index
    %c0_33 = arith.constant 0 : index
    %c0_34 = arith.constant 0 : index
    %38 = vector.load %arg4[%c3_32, %c0_33, %c0_34] : memref<16x128x128xbf16, #tpu.memory_space<vmem>>, vector<1x128x128xbf16>
    %39 = vector.shape_cast %38 : vector<1x128x128xbf16> to vector<128x128xbf16>
    %cst_35 = arith.constant dense<0.000000e+00> : vector<104x128xf32>
    %40 = tpu.matmul %37, %39, %cst_35 {dimension_numbers = #tpu.dot_dimension_numbers<[1], [0], [0], [1], [0, 0, 1, 1], [], []>} : vector<104x128xbf16>, vector<128x128xbf16>, vector<104x128xf32> -> vector<104x128xf32>
    %41 = arith.addf %33, %40 : vector<104x128xf32>
    %c4 = arith.constant 4 : index
    %c0_36 = arith.constant 0 : index
    %c0_37 = arith.constant 0 : index
    %42 = vector.load %arg3[%c4, %c0_36, %c0_37] : memref<16x104x392xbf16, #tpu.memory_space<vmem>>, vector<1x104x392xbf16>
    %43 = vector.shape_cast %42 : vector<1x104x392xbf16> to vector<104x392xbf16>
    %cst_38 = arith.constant dense<0.000000e+00> : vector<104x128xf32>
    %44 = tpu.matmul %43, %8, %cst_38 {dimension_numbers = #tpu.dot_dimension_numbers<[1], [0], [0], [1], [0, 0, 1, 1], [], []>} : vector<104x392xbf16>, vector<392x128xbf16>, vector<104x128xf32> -> vector<104x128xf32>
    %45 = arith.truncf %44 : vector<104x128xf32> to vector<104x128xbf16>
    %c4_39 = arith.constant 4 : index
    %c0_40 = arith.constant 0 : index
    %c0_41 = arith.constant 0 : index
    %46 = vector.load %arg4[%c4_39, %c0_40, %c0_41] : memref<16x128x128xbf16, #tpu.memory_space<vmem>>, vector<1x128x128xbf16>
    %47 = vector.shape_cast %46 : vector<1x128x128xbf16> to vector<128x128xbf16>
    %cst_42 = arith.constant dense<0.000000e+00> : vector<104x128xf32>
    %48 = tpu.matmul %45, %47, %cst_42 {dimension_numbers = #tpu.dot_dimension_numbers<[1], [0], [0], [1], [0, 0, 1, 1], [], []>} : vector<104x128xbf16>, vector<128x128xbf16>, vector<104x128xf32> -> vector<104x128xf32>
    %49 = arith.addf %41, %48 : vector<104x128xf32>
    %c5 = arith.constant 5 : index
    %c0_43 = arith.constant 0 : index
    %c0_44 = arith.constant 0 : index
    %50 = vector.load %arg3[%c5, %c0_43, %c0_44] : memref<16x104x392xbf16, #tpu.memory_space<vmem>>, vector<1x104x392xbf16>
    %51 = vector.shape_cast %50 : vector<1x104x392xbf16> to vector<104x392xbf16>
    %cst_45 = arith.constant dense<0.000000e+00> : vector<104x128xf32>
    %52 = tpu.matmul %51, %8, %cst_45 {dimension_numbers = #tpu.dot_dimension_numbers<[1], [0], [0], [1], [0, 0, 1, 1], [], []>} : vector<104x392xbf16>, vector<392x128xbf16>, vector<104x128xf32> -> vector<104x128xf32>
    %53 = arith.truncf %52 : vector<104x128xf32> to vector<104x128xbf16>
    %c5_46 = arith.constant 5 : index
    %c0_47 = arith.constant 0 : index
    %c0_48 = arith.constant 0 : index
    %54 = vector.load %arg4[%c5_46, %c0_47, %c0_48] : memref<16x128x128xbf16, #tpu.memory_space<vmem>>, vector<1x128x128xbf16>
    %55 = vector.shape_cast %54 : vector<1x128x128xbf16> to vector<128x128xbf16>
    %cst_49 = arith.constant dense<0.000000e+00> : vector<104x128xf32>
    %56 = tpu.matmul %53, %55, %cst_49 {dimension_numbers = #tpu.dot_dimension_numbers<[1], [0], [0], [1], [0, 0, 1, 1], [], []>} : vector<104x128xbf16>, vector<128x128xbf16>, vector<104x128xf32> -> vector<104x128xf32>
    %57 = arith.addf %49, %56 : vector<104x128xf32>
    %c6 = arith.constant 6 : index
    %c0_50 = arith.constant 0 : index
    %c0_51 = arith.constant 0 : index
    %58 = vector.load %arg3[%c6, %c0_50, %c0_51] : memref<16x104x392xbf16, #tpu.memory_space<vmem>>, vector<1x104x392xbf16>
    %59 = vector.shape_cast %58 : vector<1x104x392xbf16> to vector<104x392xbf16>
    %cst_52 = arith.constant dense<0.000000e+00> : vector<104x128xf32>
    %60 = tpu.matmul %59, %8, %cst_52 {dimension_numbers = #tpu.dot_dimension_numbers<[1], [0], [0], [1], [0, 0, 1, 1], [], []>} : vector<104x392xbf16>, vector<392x128xbf16>, vector<104x128xf32> -> vector<104x128xf32>
    %61 = arith.truncf %60 : vector<104x128xf32> to vector<104x128xbf16>
    %c6_53 = arith.constant 6 : index
    %c0_54 = arith.constant 0 : index
    %c0_55 = arith.constant 0 : index
    %62 = vector.load %arg4[%c6_53, %c0_54, %c0_55] : memref<16x128x128xbf16, #tpu.memory_space<vmem>>, vector<1x128x128xbf16>
    %63 = vector.shape_cast %62 : vector<1x128x128xbf16> to vector<128x128xbf16>
    %cst_56 = arith.constant dense<0.000000e+00> : vector<104x128xf32>
    %64 = tpu.matmul %61, %63, %cst_56 {dimension_numbers = #tpu.dot_dimension_numbers<[1], [0], [0], [1], [0, 0, 1, 1], [], []>} : vector<104x128xbf16>, vector<128x128xbf16>, vector<104x128xf32> -> vector<104x128xf32>
    %65 = arith.addf %57, %64 : vector<104x128xf32>
    %c7 = arith.constant 7 : index
    %c0_57 = arith.constant 0 : index
    %c0_58 = arith.constant 0 : index
    %66 = vector.load %arg3[%c7, %c0_57, %c0_58] : memref<16x104x392xbf16, #tpu.memory_space<vmem>>, vector<1x104x392xbf16>
    %67 = vector.shape_cast %66 : vector<1x104x392xbf16> to vector<104x392xbf16>
    %cst_59 = arith.constant dense<0.000000e+00> : vector<104x128xf32>
    %68 = tpu.matmul %67, %8, %cst_59 {dimension_numbers = #tpu.dot_dimension_numbers<[1], [0], [0], [1], [0, 0, 1, 1], [], []>} : vector<104x392xbf16>, vector<392x128xbf16>, vector<104x128xf32> -> vector<104x128xf32>
    %69 = arith.truncf %68 : vector<104x128xf32> to vector<104x128xbf16>
    %c7_60 = arith.constant 7 : index
    %c0_61 = arith.constant 0 : index
    %c0_62 = arith.constant 0 : index
    %70 = vector.load %arg4[%c7_60, %c0_61, %c0_62] : memref<16x128x128xbf16, #tpu.memory_space<vmem>>, vector<1x128x128xbf16>
    %71 = vector.shape_cast %70 : vector<1x128x128xbf16> to vector<128x128xbf16>
    %cst_63 = arith.constant dense<0.000000e+00> : vector<104x128xf32>
    %72 = tpu.matmul %69, %71, %cst_63 {dimension_numbers = #tpu.dot_dimension_numbers<[1], [0], [0], [1], [0, 0, 1, 1], [], []>} : vector<104x128xbf16>, vector<128x128xbf16>, vector<104x128xf32> -> vector<104x128xf32>
    %73 = arith.addf %65, %72 : vector<104x128xf32>
    %c8 = arith.constant 8 : index
    %c0_64 = arith.constant 0 : index
    %c0_65 = arith.constant 0 : index
    %74 = vector.load %arg3[%c8, %c0_64, %c0_65] : memref<16x104x392xbf16, #tpu.memory_space<vmem>>, vector<1x104x392xbf16>
    %75 = vector.shape_cast %74 : vector<1x104x392xbf16> to vector<104x392xbf16>
    %cst_66 = arith.constant dense<0.000000e+00> : vector<104x128xf32>
    %76 = tpu.matmul %75, %8, %cst_66 {dimension_numbers = #tpu.dot_dimension_numbers<[1], [0], [0], [1], [0, 0, 1, 1], [], []>} : vector<104x392xbf16>, vector<392x128xbf16>, vector<104x128xf32> -> vector<104x128xf32>
    %77 = arith.truncf %76 : vector<104x128xf32> to vector<104x128xbf16>
    %c8_67 = arith.constant 8 : index
    %c0_68 = arith.constant 0 : index
    %c0_69 = arith.constant 0 : index
    %78 = vector.load %arg4[%c8_67, %c0_68, %c0_69] : memref<16x128x128xbf16, #tpu.memory_space<vmem>>, vector<1x128x128xbf16>
    %79 = vector.shape_cast %78 : vector<1x128x128xbf16> to vector<128x128xbf16>
    %cst_70 = arith.constant dense<0.000000e+00> : vector<104x128xf32>
    %80 = tpu.matmul %77, %79, %cst_70 {dimension_numbers = #tpu.dot_dimension_numbers<[1], [0], [0], [1], [0, 0, 1, 1], [], []>} : vector<104x128xbf16>, vector<128x128xbf16>, vector<104x128xf32> -> vector<104x128xf32>
    %81 = arith.addf %73, %80 : vector<104x128xf32>
    %c9 = arith.constant 9 : index
    %c0_71 = arith.constant 0 : index
    %c0_72 = arith.constant 0 : index
    %82 = vector.load %arg3[%c9, %c0_71, %c0_72] : memref<16x104x392xbf16, #tpu.memory_space<vmem>>, vector<1x104x392xbf16>
    %83 = vector.shape_cast %82 : vector<1x104x392xbf16> to vector<104x392xbf16>
    %cst_73 = arith.constant dense<0.000000e+00> : vector<104x128xf32>
    %84 = tpu.matmul %83, %8, %cst_73 {dimension_numbers = #tpu.dot_dimension_numbers<[1], [0], [0], [1], [0, 0, 1, 1], [], []>} : vector<104x392xbf16>, vector<392x128xbf16>, vector<104x128xf32> -> vector<104x128xf32>
    %85 = arith.truncf %84 : vector<104x128xf32> to vector<104x128xbf16>
    %c9_74 = arith.constant 9 : index
    %c0_75 = arith.constant 0 : index
    %c0_76 = arith.constant 0 : index
    %86 = vector.load %arg4[%c9_74, %c0_75, %c0_76] : memref<16x128x128xbf16, #tpu.memory_space<vmem>>, vector<1x128x128xbf16>
    %87 = vector.shape_cast %86 : vector<1x128x128xbf16> to vector<128x128xbf16>
    %cst_77 = arith.constant dense<0.000000e+00> : vector<104x128xf32>
    %88 = tpu.matmul %85, %87, %cst_77 {dimension_numbers = #tpu.dot_dimension_numbers<[1], [0], [0], [1], [0, 0, 1, 1], [], []>} : vector<104x128xbf16>, vector<128x128xbf16>, vector<104x128xf32> -> vector<104x128xf32>
    %89 = arith.addf %81, %88 : vector<104x128xf32>
    %c10 = arith.constant 10 : index
    %c0_78 = arith.constant 0 : index
    %c0_79 = arith.constant 0 : index
    %90 = vector.load %arg3[%c10, %c0_78, %c0_79] : memref<16x104x392xbf16, #tpu.memory_space<vmem>>, vector<1x104x392xbf16>
    %91 = vector.shape_cast %90 : vector<1x104x392xbf16> to vector<104x392xbf16>
    %cst_80 = arith.constant dense<0.000000e+00> : vector<104x128xf32>
    %92 = tpu.matmul %91, %8, %cst_80 {dimension_numbers = #tpu.dot_dimension_numbers<[1], [0], [0], [1], [0, 0, 1, 1], [], []>} : vector<104x392xbf16>, vector<392x128xbf16>, vector<104x128xf32> -> vector<104x128xf32>
    %93 = arith.truncf %92 : vector<104x128xf32> to vector<104x128xbf16>
    %c10_81 = arith.constant 10 : index
    %c0_82 = arith.constant 0 : index
    %c0_83 = arith.constant 0 : index
    %94 = vector.load %arg4[%c10_81, %c0_82, %c0_83] : memref<16x128x128xbf16, #tpu.memory_space<vmem>>, vector<1x128x128xbf16>
    %95 = vector.shape_cast %94 : vector<1x128x128xbf16> to vector<128x128xbf16>
    %cst_84 = arith.constant dense<0.000000e+00> : vector<104x128xf32>
    %96 = tpu.matmul %93, %95, %cst_84 {dimension_numbers = #tpu.dot_dimension_numbers<[1], [0], [0], [1], [0, 0, 1, 1], [], []>} : vector<104x128xbf16>, vector<128x128xbf16>, vector<104x128xf32> -> vector<104x128xf32>
    %97 = arith.addf %89, %96 : vector<104x128xf32>
    %c11 = arith.constant 11 : index
    %c0_85 = arith.constant 0 : index
    %c0_86 = arith.constant 0 : index
    %98 = vector.load %arg3[%c11, %c0_85, %c0_86] : memref<16x104x392xbf16, #tpu.memory_space<vmem>>, vector<1x104x392xbf16>
    %99 = vector.shape_cast %98 : vector<1x104x392xbf16> to vector<104x392xbf16>
    %cst_87 = arith.constant dense<0.000000e+00> : vector<104x128xf32>
    %100 = tpu.matmul %99, %8, %cst_87 {dimension_numbers = #tpu.dot_dimension_numbers<[1], [0], [0], [1], [0, 0, 1, 1], [], []>} : vector<104x392xbf16>, vector<392x128xbf16>, vector<104x128xf32> -> vector<104x128xf32>
    %101 = arith.truncf %100 : vector<104x128xf32> to vector<104x128xbf16>
    %c11_88 = arith.constant 11 : index
    %c0_89 = arith.constant 0 : index
    %c0_90 = arith.constant 0 : index
    %102 = vector.load %arg4[%c11_88, %c0_89, %c0_90] : memref<16x128x128xbf16, #tpu.memory_space<vmem>>, vector<1x128x128xbf16>
    %103 = vector.shape_cast %102 : vector<1x128x128xbf16> to vector<128x128xbf16>
    %cst_91 = arith.constant dense<0.000000e+00> : vector<104x128xf32>
    %104 = tpu.matmul %101, %103, %cst_91 {dimension_numbers = #tpu.dot_dimension_numbers<[1], [0], [0], [1], [0, 0, 1, 1], [], []>} : vector<104x128xbf16>, vector<128x128xbf16>, vector<104x128xf32> -> vector<104x128xf32>
    %105 = arith.addf %97, %104 : vector<104x128xf32>
    %c12 = arith.constant 12 : index
    %c0_92 = arith.constant 0 : index
    %c0_93 = arith.constant 0 : index
    %106 = vector.load %arg3[%c12, %c0_92, %c0_93] : memref<16x104x392xbf16, #tpu.memory_space<vmem>>, vector<1x104x392xbf16>
    %107 = vector.shape_cast %106 : vector<1x104x392xbf16> to vector<104x392xbf16>
    %cst_94 = arith.constant dense<0.000000e+00> : vector<104x128xf32>
    %108 = tpu.matmul %107, %8, %cst_94 {dimension_numbers = #tpu.dot_dimension_numbers<[1], [0], [0], [1], [0, 0, 1, 1], [], []>} : vector<104x392xbf16>, vector<392x128xbf16>, vector<104x128xf32> -> vector<104x128xf32>
    %109 = arith.truncf %108 : vector<104x128xf32> to vector<104x128xbf16>
    %c12_95 = arith.constant 12 : index
    %c0_96 = arith.constant 0 : index
    %c0_97 = arith.constant 0 : index
    %110 = vector.load %arg4[%c12_95, %c0_96, %c0_97] : memref<16x128x128xbf16, #tpu.memory_space<vmem>>, vector<1x128x128xbf16>
    %111 = vector.shape_cast %110 : vector<1x128x128xbf16> to vector<128x128xbf16>
    %cst_98 = arith.constant dense<0.000000e+00> : vector<104x128xf32>
    %112 = tpu.matmul %109, %111, %cst_98 {dimension_numbers = #tpu.dot_dimension_numbers<[1], [0], [0], [1], [0, 0, 1, 1], [], []>} : vector<104x128xbf16>, vector<128x128xbf16>, vector<104x128xf32> -> vector<104x128xf32>
    %113 = arith.addf %105, %112 : vector<104x128xf32>
    %c13 = arith.constant 13 : index
    %c0_99 = arith.constant 0 : index
    %c0_100 = arith.constant 0 : index
    %114 = vector.load %arg3[%c13, %c0_99, %c0_100] : memref<16x104x392xbf16, #tpu.memory_space<vmem>>, vector<1x104x392xbf16>
    %115 = vector.shape_cast %114 : vector<1x104x392xbf16> to vector<104x392xbf16>
    %cst_101 = arith.constant dense<0.000000e+00> : vector<104x128xf32>
    %116 = tpu.matmul %115, %8, %cst_101 {dimension_numbers = #tpu.dot_dimension_numbers<[1], [0], [0], [1], [0, 0, 1, 1], [], []>} : vector<104x392xbf16>, vector<392x128xbf16>, vector<104x128xf32> -> vector<104x128xf32>
    %117 = arith.truncf %116 : vector<104x128xf32> to vector<104x128xbf16>
    %c13_102 = arith.constant 13 : index
    %c0_103 = arith.constant 0 : index
    %c0_104 = arith.constant 0 : index
    %118 = vector.load %arg4[%c13_102, %c0_103, %c0_104] : memref<16x128x128xbf16, #tpu.memory_space<vmem>>, vector<1x128x128xbf16>
    %119 = vector.shape_cast %118 : vector<1x128x128xbf16> to vector<128x128xbf16>
    %cst_105 = arith.constant dense<0.000000e+00> : vector<104x128xf32>
    %120 = tpu.matmul %117, %119, %cst_105 {dimension_numbers = #tpu.dot_dimension_numbers<[1], [0], [0], [1], [0, 0, 1, 1], [], []>} : vector<104x128xbf16>, vector<128x128xbf16>, vector<104x128xf32> -> vector<104x128xf32>
    %121 = arith.addf %113, %120 : vector<104x128xf32>
    %c14 = arith.constant 14 : index
    %c0_106 = arith.constant 0 : index
    %c0_107 = arith.constant 0 : index
    %122 = vector.load %arg3[%c14, %c0_106, %c0_107] : memref<16x104x392xbf16, #tpu.memory_space<vmem>>, vector<1x104x392xbf16>
    %123 = vector.shape_cast %122 : vector<1x104x392xbf16> to vector<104x392xbf16>
    %cst_108 = arith.constant dense<0.000000e+00> : vector<104x128xf32>
    %124 = tpu.matmul %123, %8, %cst_108 {dimension_numbers = #tpu.dot_dimension_numbers<[1], [0], [0], [1], [0, 0, 1, 1], [], []>} : vector<104x392xbf16>, vector<392x128xbf16>, vector<104x128xf32> -> vector<104x128xf32>
    %125 = arith.truncf %124 : vector<104x128xf32> to vector<104x128xbf16>
    %c14_109 = arith.constant 14 : index
    %c0_110 = arith.constant 0 : index
    %c0_111 = arith.constant 0 : index
    %126 = vector.load %arg4[%c14_109, %c0_110, %c0_111] : memref<16x128x128xbf16, #tpu.memory_space<vmem>>, vector<1x128x128xbf16>
    %127 = vector.shape_cast %126 : vector<1x128x128xbf16> to vector<128x128xbf16>
    %cst_112 = arith.constant dense<0.000000e+00> : vector<104x128xf32>
    %128 = tpu.matmul %125, %127, %cst_112 {dimension_numbers = #tpu.dot_dimension_numbers<[1], [0], [0], [1], [0, 0, 1, 1], [], []>} : vector<104x128xbf16>, vector<128x128xbf16>, vector<104x128xf32> -> vector<104x128xf32>
    %129 = arith.addf %121, %128 : vector<104x128xf32>
    %c15 = arith.constant 15 : index
    %c0_113 = arith.constant 0 : index
    %c0_114 = arith.constant 0 : index
    %130 = vector.load %arg3[%c15, %c0_113, %c0_114] : memref<16x104x392xbf16, #tpu.memory_space<vmem>>, vector<1x104x392xbf16>
    %131 = vector.shape_cast %130 : vector<1x104x392xbf16> to vector<104x392xbf16>
    %cst_115 = arith.constant dense<0.000000e+00> : vector<104x128xf32>
    %132 = tpu.matmul %131, %8, %cst_115 {dimension_numbers = #tpu.dot_dimension_numbers<[1], [0], [0], [1], [0, 0, 1, 1], [], []>} : vector<104x392xbf16>, vector<392x128xbf16>, vector<104x128xf32> -> vector<104x128xf32>
    %133 = arith.truncf %132 : vector<104x128xf32> to vector<104x128xbf16>
    %c15_116 = arith.constant 15 : index
    %c0_117 = arith.constant 0 : index
    %c0_118 = arith.constant 0 : index
    %134 = vector.load %arg4[%c15_116, %c0_117, %c0_118] : memref<16x128x128xbf16, #tpu.memory_space<vmem>>, vector<1x128x128xbf16>
    %135 = vector.shape_cast %134 : vector<1x128x128xbf16> to vector<128x128xbf16>
    %cst_119 = arith.constant dense<0.000000e+00> : vector<104x128xf32>
    %136 = tpu.matmul %133, %135, %cst_119 {dimension_numbers = #tpu.dot_dimension_numbers<[1], [0], [0], [1], [0, 0, 1, 1], [], []>} : vector<104x128xbf16>, vector<128x128xbf16>, vector<104x128xf32> -> vector<104x128xf32>
    %137 = arith.addf %129, %136 : vector<104x128xf32>
    %c0_120 = arith.constant 0 : index
    %c0_121 = arith.constant 0 : index
    %138 = vector.load %arg5[%c0_120, %c0_121] : memref<1x128xf32, #tpu.memory_space<vmem>>, vector<1x128xf32>
    %139 = vector.broadcast %138 : vector<1x128xf32> to vector<104x128xf32>
    %140 = arith.addf %137, %139 : vector<104x128xf32>
    %cst_122 = arith.constant 0.000000e+00 : f32
    %141 = vector.broadcast %cst_122 : f32 to vector<104x128xf32>
    %142 = arith.maximumf %140, %141 : vector<104x128xf32>
    %143 = arith.truncf %142 : vector<104x128xf32> to vector<104x128xbf16>
    %cst_123 = arith.constant 0.000000e+00 : f32
    %144 = vector.broadcast %cst_123 : f32 to vector<24x128xf32>
    %c0_124 = arith.constant 0 : index
    %c0_125 = arith.constant 0 : index
    %c0_126 = arith.constant 0 : index
    %145 = vector.load %arg6[%c0_124, %c0_125, %c0_126] : memref<16x24x104xbf16, #tpu.memory_space<vmem>>, vector<1x24x104xbf16>
    %146 = vector.shape_cast %145 : vector<1x24x104xbf16> to vector<24x104xbf16>
    %cst_127 = arith.constant dense<0.000000e+00> : vector<24x128xf32>
    %147 = tpu.matmul %146, %143, %cst_127 {dimension_numbers = #tpu.dot_dimension_numbers<[1], [0], [0], [1], [0, 0, 1, 1], [], []>} : vector<24x104xbf16>, vector<104x128xbf16>, vector<24x128xf32> -> vector<24x128xf32>
    %148 = arith.truncf %147 : vector<24x128xf32> to vector<24x128xbf16>
    %c0_128 = arith.constant 0 : index
    %c0_129 = arith.constant 0 : index
    %c0_130 = arith.constant 0 : index
    %149 = vector.load %arg7[%c0_128, %c0_129, %c0_130] : memref<16x128x128xbf16, #tpu.memory_space<vmem>>, vector<1x128x128xbf16>
    %150 = vector.shape_cast %149 : vector<1x128x128xbf16> to vector<128x128xbf16>
    %cst_131 = arith.constant dense<0.000000e+00> : vector<24x128xf32>
    %151 = tpu.matmul %148, %150, %cst_131 {dimension_numbers = #tpu.dot_dimension_numbers<[1], [0], [0], [1], [0, 0, 1, 1], [], []>} : vector<24x128xbf16>, vector<128x128xbf16>, vector<24x128xf32> -> vector<24x128xf32>
    %152 = arith.addf %144, %151 : vector<24x128xf32>
    %c1_132 = arith.constant 1 : index
    %c0_133 = arith.constant 0 : index
    %c0_134 = arith.constant 0 : index
    %153 = vector.load %arg6[%c1_132, %c0_133, %c0_134] : memref<16x24x104xbf16, #tpu.memory_space<vmem>>, vector<1x24x104xbf16>
    %154 = vector.shape_cast %153 : vector<1x24x104xbf16> to vector<24x104xbf16>
    %cst_135 = arith.constant dense<0.000000e+00> : vector<24x128xf32>
    %155 = tpu.matmul %154, %143, %cst_135 {dimension_numbers = #tpu.dot_dimension_numbers<[1], [0], [0], [1], [0, 0, 1, 1], [], []>} : vector<24x104xbf16>, vector<104x128xbf16>, vector<24x128xf32> -> vector<24x128xf32>
    %156 = arith.truncf %155 : vector<24x128xf32> to vector<24x128xbf16>
    %c1_136 = arith.constant 1 : index
    %c0_137 = arith.constant 0 : index
    %c0_138 = arith.constant 0 : index
    %157 = vector.load %arg7[%c1_136, %c0_137, %c0_138] : memref<16x128x128xbf16, #tpu.memory_space<vmem>>, vector<1x128x128xbf16>
    %158 = vector.shape_cast %157 : vector<1x128x128xbf16> to vector<128x128xbf16>
    %cst_139 = arith.constant dense<0.000000e+00> : vector<24x128xf32>
    %159 = tpu.matmul %156, %158, %cst_139 {dimension_numbers = #tpu.dot_dimension_numbers<[1], [0], [0], [1], [0, 0, 1, 1], [], []>} : vector<24x128xbf16>, vector<128x128xbf16>, vector<24x128xf32> -> vector<24x128xf32>
    %160 = arith.addf %152, %159 : vector<24x128xf32>
    %c2_140 = arith.constant 2 : index
    %c0_141 = arith.constant 0 : index
    %c0_142 = arith.constant 0 : index
    %161 = vector.load %arg6[%c2_140, %c0_141, %c0_142] : memref<16x24x104xbf16, #tpu.memory_space<vmem>>, vector<1x24x104xbf16>
    %162 = vector.shape_cast %161 : vector<1x24x104xbf16> to vector<24x104xbf16>
    %cst_143 = arith.constant dense<0.000000e+00> : vector<24x128xf32>
    %163 = tpu.matmul %162, %143, %cst_143 {dimension_numbers = #tpu.dot_dimension_numbers<[1], [0], [0], [1], [0, 0, 1, 1], [], []>} : vector<24x104xbf16>, vector<104x128xbf16>, vector<24x128xf32> -> vector<24x128xf32>
    %164 = arith.truncf %163 : vector<24x128xf32> to vector<24x128xbf16>
    %c2_144 = arith.constant 2 : index
    %c0_145 = arith.constant 0 : index
    %c0_146 = arith.constant 0 : index
    %165 = vector.load %arg7[%c2_144, %c0_145, %c0_146] : memref<16x128x128xbf16, #tpu.memory_space<vmem>>, vector<1x128x128xbf16>
    %166 = vector.shape_cast %165 : vector<1x128x128xbf16> to vector<128x128xbf16>
    %cst_147 = arith.constant dense<0.000000e+00> : vector<24x128xf32>
    %167 = tpu.matmul %164, %166, %cst_147 {dimension_numbers = #tpu.dot_dimension_numbers<[1], [0], [0], [1], [0, 0, 1, 1], [], []>} : vector<24x128xbf16>, vector<128x128xbf16>, vector<24x128xf32> -> vector<24x128xf32>
    %168 = arith.addf %160, %167 : vector<24x128xf32>
    %c3_148 = arith.constant 3 : index
    %c0_149 = arith.constant 0 : index
    %c0_150 = arith.constant 0 : index
    %169 = vector.load %arg6[%c3_148, %c0_149, %c0_150] : memref<16x24x104xbf16, #tpu.memory_space<vmem>>, vector<1x24x104xbf16>
    %170 = vector.shape_cast %169 : vector<1x24x104xbf16> to vector<24x104xbf16>
    %cst_151 = arith.constant dense<0.000000e+00> : vector<24x128xf32>
    %171 = tpu.matmul %170, %143, %cst_151 {dimension_numbers = #tpu.dot_dimension_numbers<[1], [0], [0], [1], [0, 0, 1, 1], [], []>} : vector<24x104xbf16>, vector<104x128xbf16>, vector<24x128xf32> -> vector<24x128xf32>
    %172 = arith.truncf %171 : vector<24x128xf32> to vector<24x128xbf16>
    %c3_152 = arith.constant 3 : index
    %c0_153 = arith.constant 0 : index
    %c0_154 = arith.constant 0 : index
    %173 = vector.load %arg7[%c3_152, %c0_153, %c0_154] : memref<16x128x128xbf16, #tpu.memory_space<vmem>>, vector<1x128x128xbf16>
    %174 = vector.shape_cast %173 : vector<1x128x128xbf16> to vector<128x128xbf16>
    %cst_155 = arith.constant dense<0.000000e+00> : vector<24x128xf32>
    %175 = tpu.matmul %172, %174, %cst_155 {dimension_numbers = #tpu.dot_dimension_numbers<[1], [0], [0], [1], [0, 0, 1, 1], [], []>} : vector<24x128xbf16>, vector<128x128xbf16>, vector<24x128xf32> -> vector<24x128xf32>
    %176 = arith.addf %168, %175 : vector<24x128xf32>
    %c4_156 = arith.constant 4 : index
    %c0_157 = arith.constant 0 : index
    %c0_158 = arith.constant 0 : index
    %177 = vector.load %arg6[%c4_156, %c0_157, %c0_158] : memref<16x24x104xbf16, #tpu.memory_space<vmem>>, vector<1x24x104xbf16>
    %178 = vector.shape_cast %177 : vector<1x24x104xbf16> to vector<24x104xbf16>
    %cst_159 = arith.constant dense<0.000000e+00> : vector<24x128xf32>
    %179 = tpu.matmul %178, %143, %cst_159 {dimension_numbers = #tpu.dot_dimension_numbers<[1], [0], [0], [1], [0, 0, 1, 1], [], []>} : vector<24x104xbf16>, vector<104x128xbf16>, vector<24x128xf32> -> vector<24x128xf32>
    %180 = arith.truncf %179 : vector<24x128xf32> to vector<24x128xbf16>
    %c4_160 = arith.constant 4 : index
    %c0_161 = arith.constant 0 : index
    %c0_162 = arith.constant 0 : index
    %181 = vector.load %arg7[%c4_160, %c0_161, %c0_162] : memref<16x128x128xbf16, #tpu.memory_space<vmem>>, vector<1x128x128xbf16>
    %182 = vector.shape_cast %181 : vector<1x128x128xbf16> to vector<128x128xbf16>
    %cst_163 = arith.constant dense<0.000000e+00> : vector<24x128xf32>
    %183 = tpu.matmul %180, %182, %cst_163 {dimension_numbers = #tpu.dot_dimension_numbers<[1], [0], [0], [1], [0, 0, 1, 1], [], []>} : vector<24x128xbf16>, vector<128x128xbf16>, vector<24x128xf32> -> vector<24x128xf32>
    %184 = arith.addf %176, %183 : vector<24x128xf32>
    %c5_164 = arith.constant 5 : index
    %c0_165 = arith.constant 0 : index
    %c0_166 = arith.constant 0 : index
    %185 = vector.load %arg6[%c5_164, %c0_165, %c0_166] : memref<16x24x104xbf16, #tpu.memory_space<vmem>>, vector<1x24x104xbf16>
    %186 = vector.shape_cast %185 : vector<1x24x104xbf16> to vector<24x104xbf16>
    %cst_167 = arith.constant dense<0.000000e+00> : vector<24x128xf32>
    %187 = tpu.matmul %186, %143, %cst_167 {dimension_numbers = #tpu.dot_dimension_numbers<[1], [0], [0], [1], [0, 0, 1, 1], [], []>} : vector<24x104xbf16>, vector<104x128xbf16>, vector<24x128xf32> -> vector<24x128xf32>
    %188 = arith.truncf %187 : vector<24x128xf32> to vector<24x128xbf16>
    %c5_168 = arith.constant 5 : index
    %c0_169 = arith.constant 0 : index
    %c0_170 = arith.constant 0 : index
    %189 = vector.load %arg7[%c5_168, %c0_169, %c0_170] : memref<16x128x128xbf16, #tpu.memory_space<vmem>>, vector<1x128x128xbf16>
    %190 = vector.shape_cast %189 : vector<1x128x128xbf16> to vector<128x128xbf16>
    %cst_171 = arith.constant dense<0.000000e+00> : vector<24x128xf32>
    %191 = tpu.matmul %188, %190, %cst_171 {dimension_numbers = #tpu.dot_dimension_numbers<[1], [0], [0], [1], [0, 0, 1, 1], [], []>} : vector<24x128xbf16>, vector<128x128xbf16>, vector<24x128xf32> -> vector<24x128xf32>
    %192 = arith.addf %184, %191 : vector<24x128xf32>
    %c6_172 = arith.constant 6 : index
    %c0_173 = arith.constant 0 : index
    %c0_174 = arith.constant 0 : index
    %193 = vector.load %arg6[%c6_172, %c0_173, %c0_174] : memref<16x24x104xbf16, #tpu.memory_space<vmem>>, vector<1x24x104xbf16>
    %194 = vector.shape_cast %193 : vector<1x24x104xbf16> to vector<24x104xbf16>
    %cst_175 = arith.constant dense<0.000000e+00> : vector<24x128xf32>
    %195 = tpu.matmul %194, %143, %cst_175 {dimension_numbers = #tpu.dot_dimension_numbers<[1], [0], [0], [1], [0, 0, 1, 1], [], []>} : vector<24x104xbf16>, vector<104x128xbf16>, vector<24x128xf32> -> vector<24x128xf32>
    %196 = arith.truncf %195 : vector<24x128xf32> to vector<24x128xbf16>
    %c6_176 = arith.constant 6 : index
    %c0_177 = arith.constant 0 : index
    %c0_178 = arith.constant 0 : index
    %197 = vector.load %arg7[%c6_176, %c0_177, %c0_178] : memref<16x128x128xbf16, #tpu.memory_space<vmem>>, vector<1x128x128xbf16>
    %198 = vector.shape_cast %197 : vector<1x128x128xbf16> to vector<128x128xbf16>
    %cst_179 = arith.constant dense<0.000000e+00> : vector<24x128xf32>
    %199 = tpu.matmul %196, %198, %cst_179 {dimension_numbers = #tpu.dot_dimension_numbers<[1], [0], [0], [1], [0, 0, 1, 1], [], []>} : vector<24x128xbf16>, vector<128x128xbf16>, vector<24x128xf32> -> vector<24x128xf32>
    %200 = arith.addf %192, %199 : vector<24x128xf32>
    %c7_180 = arith.constant 7 : index
    %c0_181 = arith.constant 0 : index
    %c0_182 = arith.constant 0 : index
    %201 = vector.load %arg6[%c7_180, %c0_181, %c0_182] : memref<16x24x104xbf16, #tpu.memory_space<vmem>>, vector<1x24x104xbf16>
    %202 = vector.shape_cast %201 : vector<1x24x104xbf16> to vector<24x104xbf16>
    %cst_183 = arith.constant dense<0.000000e+00> : vector<24x128xf32>
    %203 = tpu.matmul %202, %143, %cst_183 {dimension_numbers = #tpu.dot_dimension_numbers<[1], [0], [0], [1], [0, 0, 1, 1], [], []>} : vector<24x104xbf16>, vector<104x128xbf16>, vector<24x128xf32> -> vector<24x128xf32>
    %204 = arith.truncf %203 : vector<24x128xf32> to vector<24x128xbf16>
    %c7_184 = arith.constant 7 : index
    %c0_185 = arith.constant 0 : index
    %c0_186 = arith.constant 0 : index
    %205 = vector.load %arg7[%c7_184, %c0_185, %c0_186] : memref<16x128x128xbf16, #tpu.memory_space<vmem>>, vector<1x128x128xbf16>
    %206 = vector.shape_cast %205 : vector<1x128x128xbf16> to vector<128x128xbf16>
    %cst_187 = arith.constant dense<0.000000e+00> : vector<24x128xf32>
    %207 = tpu.matmul %204, %206, %cst_187 {dimension_numbers = #tpu.dot_dimension_numbers<[1], [0], [0], [1], [0, 0, 1, 1], [], []>} : vector<24x128xbf16>, vector<128x128xbf16>, vector<24x128xf32> -> vector<24x128xf32>
    %208 = arith.addf %200, %207 : vector<24x128xf32>
    %c8_188 = arith.constant 8 : index
    %c0_189 = arith.constant 0 : index
    %c0_190 = arith.constant 0 : index
    %209 = vector.load %arg6[%c8_188, %c0_189, %c0_190] : memref<16x24x104xbf16, #tpu.memory_space<vmem>>, vector<1x24x104xbf16>
    %210 = vector.shape_cast %209 : vector<1x24x104xbf16> to vector<24x104xbf16>
    %cst_191 = arith.constant dense<0.000000e+00> : vector<24x128xf32>
    %211 = tpu.matmul %210, %143, %cst_191 {dimension_numbers = #tpu.dot_dimension_numbers<[1], [0], [0], [1], [0, 0, 1, 1], [], []>} : vector<24x104xbf16>, vector<104x128xbf16>, vector<24x128xf32> -> vector<24x128xf32>
    %212 = arith.truncf %211 : vector<24x128xf32> to vector<24x128xbf16>
    %c8_192 = arith.constant 8 : index
    %c0_193 = arith.constant 0 : index
    %c0_194 = arith.constant 0 : index
    %213 = vector.load %arg7[%c8_192, %c0_193, %c0_194] : memref<16x128x128xbf16, #tpu.memory_space<vmem>>, vector<1x128x128xbf16>
    %214 = vector.shape_cast %213 : vector<1x128x128xbf16> to vector<128x128xbf16>
    %cst_195 = arith.constant dense<0.000000e+00> : vector<24x128xf32>
    %215 = tpu.matmul %212, %214, %cst_195 {dimension_numbers = #tpu.dot_dimension_numbers<[1], [0], [0], [1], [0, 0, 1, 1], [], []>} : vector<24x128xbf16>, vector<128x128xbf16>, vector<24x128xf32> -> vector<24x128xf32>
    %216 = arith.addf %208, %215 : vector<24x128xf32>
    %c9_196 = arith.constant 9 : index
    %c0_197 = arith.constant 0 : index
    %c0_198 = arith.constant 0 : index
    %217 = vector.load %arg6[%c9_196, %c0_197, %c0_198] : memref<16x24x104xbf16, #tpu.memory_space<vmem>>, vector<1x24x104xbf16>
    %218 = vector.shape_cast %217 : vector<1x24x104xbf16> to vector<24x104xbf16>
    %cst_199 = arith.constant dense<0.000000e+00> : vector<24x128xf32>
    %219 = tpu.matmul %218, %143, %cst_199 {dimension_numbers = #tpu.dot_dimension_numbers<[1], [0], [0], [1], [0, 0, 1, 1], [], []>} : vector<24x104xbf16>, vector<104x128xbf16>, vector<24x128xf32> -> vector<24x128xf32>
    %220 = arith.truncf %219 : vector<24x128xf32> to vector<24x128xbf16>
    %c9_200 = arith.constant 9 : index
    %c0_201 = arith.constant 0 : index
    %c0_202 = arith.constant 0 : index
    %221 = vector.load %arg7[%c9_200, %c0_201, %c0_202] : memref<16x128x128xbf16, #tpu.memory_space<vmem>>, vector<1x128x128xbf16>
    %222 = vector.shape_cast %221 : vector<1x128x128xbf16> to vector<128x128xbf16>
    %cst_203 = arith.constant dense<0.000000e+00> : vector<24x128xf32>
    %223 = tpu.matmul %220, %222, %cst_203 {dimension_numbers = #tpu.dot_dimension_numbers<[1], [0], [0], [1], [0, 0, 1, 1], [], []>} : vector<24x128xbf16>, vector<128x128xbf16>, vector<24x128xf32> -> vector<24x128xf32>
    %224 = arith.addf %216, %223 : vector<24x128xf32>
    %c10_204 = arith.constant 10 : index
    %c0_205 = arith.constant 0 : index
    %c0_206 = arith.constant 0 : index
    %225 = vector.load %arg6[%c10_204, %c0_205, %c0_206] : memref<16x24x104xbf16, #tpu.memory_space<vmem>>, vector<1x24x104xbf16>
    %226 = vector.shape_cast %225 : vector<1x24x104xbf16> to vector<24x104xbf16>
    %cst_207 = arith.constant dense<0.000000e+00> : vector<24x128xf32>
    %227 = tpu.matmul %226, %143, %cst_207 {dimension_numbers = #tpu.dot_dimension_numbers<[1], [0], [0], [1], [0, 0, 1, 1], [], []>} : vector<24x104xbf16>, vector<104x128xbf16>, vector<24x128xf32> -> vector<24x128xf32>
    %228 = arith.truncf %227 : vector<24x128xf32> to vector<24x128xbf16>
    %c10_208 = arith.constant 10 : index
    %c0_209 = arith.constant 0 : index
    %c0_210 = arith.constant 0 : index
    %229 = vector.load %arg7[%c10_208, %c0_209, %c0_210] : memref<16x128x128xbf16, #tpu.memory_space<vmem>>, vector<1x128x128xbf16>
    %230 = vector.shape_cast %229 : vector<1x128x128xbf16> to vector<128x128xbf16>
    %cst_211 = arith.constant dense<0.000000e+00> : vector<24x128xf32>
    %231 = tpu.matmul %228, %230, %cst_211 {dimension_numbers = #tpu.dot_dimension_numbers<[1], [0], [0], [1], [0, 0, 1, 1], [], []>} : vector<24x128xbf16>, vector<128x128xbf16>, vector<24x128xf32> -> vector<24x128xf32>
    %232 = arith.addf %224, %231 : vector<24x128xf32>
    %c11_212 = arith.constant 11 : index
    %c0_213 = arith.constant 0 : index
    %c0_214 = arith.constant 0 : index
    %233 = vector.load %arg6[%c11_212, %c0_213, %c0_214] : memref<16x24x104xbf16, #tpu.memory_space<vmem>>, vector<1x24x104xbf16>
    %234 = vector.shape_cast %233 : vector<1x24x104xbf16> to vector<24x104xbf16>
    %cst_215 = arith.constant dense<0.000000e+00> : vector<24x128xf32>
    %235 = tpu.matmul %234, %143, %cst_215 {dimension_numbers = #tpu.dot_dimension_numbers<[1], [0], [0], [1], [0, 0, 1, 1], [], []>} : vector<24x104xbf16>, vector<104x128xbf16>, vector<24x128xf32> -> vector<24x128xf32>
    %236 = arith.truncf %235 : vector<24x128xf32> to vector<24x128xbf16>
    %c11_216 = arith.constant 11 : index
    %c0_217 = arith.constant 0 : index
    %c0_218 = arith.constant 0 : index
    %237 = vector.load %arg7[%c11_216, %c0_217, %c0_218] : memref<16x128x128xbf16, #tpu.memory_space<vmem>>, vector<1x128x128xbf16>
    %238 = vector.shape_cast %237 : vector<1x128x128xbf16> to vector<128x128xbf16>
    %cst_219 = arith.constant dense<0.000000e+00> : vector<24x128xf32>
    %239 = tpu.matmul %236, %238, %cst_219 {dimension_numbers = #tpu.dot_dimension_numbers<[1], [0], [0], [1], [0, 0, 1, 1], [], []>} : vector<24x128xbf16>, vector<128x128xbf16>, vector<24x128xf32> -> vector<24x128xf32>
    %240 = arith.addf %232, %239 : vector<24x128xf32>
    %c12_220 = arith.constant 12 : index
    %c0_221 = arith.constant 0 : index
    %c0_222 = arith.constant 0 : index
    %241 = vector.load %arg6[%c12_220, %c0_221, %c0_222] : memref<16x24x104xbf16, #tpu.memory_space<vmem>>, vector<1x24x104xbf16>
    %242 = vector.shape_cast %241 : vector<1x24x104xbf16> to vector<24x104xbf16>
    %cst_223 = arith.constant dense<0.000000e+00> : vector<24x128xf32>
    %243 = tpu.matmul %242, %143, %cst_223 {dimension_numbers = #tpu.dot_dimension_numbers<[1], [0], [0], [1], [0, 0, 1, 1], [], []>} : vector<24x104xbf16>, vector<104x128xbf16>, vector<24x128xf32> -> vector<24x128xf32>
    %244 = arith.truncf %243 : vector<24x128xf32> to vector<24x128xbf16>
    %c12_224 = arith.constant 12 : index
    %c0_225 = arith.constant 0 : index
    %c0_226 = arith.constant 0 : index
    %245 = vector.load %arg7[%c12_224, %c0_225, %c0_226] : memref<16x128x128xbf16, #tpu.memory_space<vmem>>, vector<1x128x128xbf16>
    %246 = vector.shape_cast %245 : vector<1x128x128xbf16> to vector<128x128xbf16>
    %cst_227 = arith.constant dense<0.000000e+00> : vector<24x128xf32>
    %247 = tpu.matmul %244, %246, %cst_227 {dimension_numbers = #tpu.dot_dimension_numbers<[1], [0], [0], [1], [0, 0, 1, 1], [], []>} : vector<24x128xbf16>, vector<128x128xbf16>, vector<24x128xf32> -> vector<24x128xf32>
    %248 = arith.addf %240, %247 : vector<24x128xf32>
    %c13_228 = arith.constant 13 : index
    %c0_229 = arith.constant 0 : index
    %c0_230 = arith.constant 0 : index
    %249 = vector.load %arg6[%c13_228, %c0_229, %c0_230] : memref<16x24x104xbf16, #tpu.memory_space<vmem>>, vector<1x24x104xbf16>
    %250 = vector.shape_cast %249 : vector<1x24x104xbf16> to vector<24x104xbf16>
    %cst_231 = arith.constant dense<0.000000e+00> : vector<24x128xf32>
    %251 = tpu.matmul %250, %143, %cst_231 {dimension_numbers = #tpu.dot_dimension_numbers<[1], [0], [0], [1], [0, 0, 1, 1], [], []>} : vector<24x104xbf16>, vector<104x128xbf16>, vector<24x128xf32> -> vector<24x128xf32>
    %252 = arith.truncf %251 : vector<24x128xf32> to vector<24x128xbf16>
    %c13_232 = arith.constant 13 : index
    %c0_233 = arith.constant 0 : index
    %c0_234 = arith.constant 0 : index
    %253 = vector.load %arg7[%c13_232, %c0_233, %c0_234] : memref<16x128x128xbf16, #tpu.memory_space<vmem>>, vector<1x128x128xbf16>
    %254 = vector.shape_cast %253 : vector<1x128x128xbf16> to vector<128x128xbf16>
    %cst_235 = arith.constant dense<0.000000e+00> : vector<24x128xf32>
    %255 = tpu.matmul %252, %254, %cst_235 {dimension_numbers = #tpu.dot_dimension_numbers<[1], [0], [0], [1], [0, 0, 1, 1], [], []>} : vector<24x128xbf16>, vector<128x128xbf16>, vector<24x128xf32> -> vector<24x128xf32>
    %256 = arith.addf %248, %255 : vector<24x128xf32>
    %c14_236 = arith.constant 14 : index
    %c0_237 = arith.constant 0 : index
    %c0_238 = arith.constant 0 : index
    %257 = vector.load %arg6[%c14_236, %c0_237, %c0_238] : memref<16x24x104xbf16, #tpu.memory_space<vmem>>, vector<1x24x104xbf16>
    %258 = vector.shape_cast %257 : vector<1x24x104xbf16> to vector<24x104xbf16>
    %cst_239 = arith.constant dense<0.000000e+00> : vector<24x128xf32>
    %259 = tpu.matmul %258, %143, %cst_239 {dimension_numbers = #tpu.dot_dimension_numbers<[1], [0], [0], [1], [0, 0, 1, 1], [], []>} : vector<24x104xbf16>, vector<104x128xbf16>, vector<24x128xf32> -> vector<24x128xf32>
    %260 = arith.truncf %259 : vector<24x128xf32> to vector<24x128xbf16>
    %c14_240 = arith.constant 14 : index
    %c0_241 = arith.constant 0 : index
    %c0_242 = arith.constant 0 : index
    %261 = vector.load %arg7[%c14_240, %c0_241, %c0_242] : memref<16x128x128xbf16, #tpu.memory_space<vmem>>, vector<1x128x128xbf16>
    %262 = vector.shape_cast %261 : vector<1x128x128xbf16> to vector<128x128xbf16>
    %cst_243 = arith.constant dense<0.000000e+00> : vector<24x128xf32>
    %263 = tpu.matmul %260, %262, %cst_243 {dimension_numbers = #tpu.dot_dimension_numbers<[1], [0], [0], [1], [0, 0, 1, 1], [], []>} : vector<24x128xbf16>, vector<128x128xbf16>, vector<24x128xf32> -> vector<24x128xf32>
    %264 = arith.addf %256, %263 : vector<24x128xf32>
    %c15_244 = arith.constant 15 : index
    %c0_245 = arith.constant 0 : index
    %c0_246 = arith.constant 0 : index
    %265 = vector.load %arg6[%c15_244, %c0_245, %c0_246] : memref<16x24x104xbf16, #tpu.memory_space<vmem>>, vector<1x24x104xbf16>
    %266 = vector.shape_cast %265 : vector<1x24x104xbf16> to vector<24x104xbf16>
    %cst_247 = arith.constant dense<0.000000e+00> : vector<24x128xf32>
    %267 = tpu.matmul %266, %143, %cst_247 {dimension_numbers = #tpu.dot_dimension_numbers<[1], [0], [0], [1], [0, 0, 1, 1], [], []>} : vector<24x104xbf16>, vector<104x128xbf16>, vector<24x128xf32> -> vector<24x128xf32>
    %268 = arith.truncf %267 : vector<24x128xf32> to vector<24x128xbf16>
    %c15_248 = arith.constant 15 : index
    %c0_249 = arith.constant 0 : index
    %c0_250 = arith.constant 0 : index
    %269 = vector.load %arg7[%c15_248, %c0_249, %c0_250] : memref<16x128x128xbf16, #tpu.memory_space<vmem>>, vector<1x128x128xbf16>
    %270 = vector.shape_cast %269 : vector<1x128x128xbf16> to vector<128x128xbf16>
    %cst_251 = arith.constant dense<0.000000e+00> : vector<24x128xf32>
    %271 = tpu.matmul %268, %270, %cst_251 {dimension_numbers = #tpu.dot_dimension_numbers<[1], [0], [0], [1], [0, 0, 1, 1], [], []>} : vector<24x128xbf16>, vector<128x128xbf16>, vector<24x128xf32> -> vector<24x128xf32>
    %272 = arith.addf %264, %271 : vector<24x128xf32>
    %c0_252 = arith.constant 0 : index
    %c0_253 = arith.constant 0 : index
    %273 = vector.load %arg8[%c0_252, %c0_253] : memref<1x128xf32, #tpu.memory_space<vmem>>, vector<1x128xf32>
    %274 = vector.broadcast %273 : vector<1x128xf32> to vector<24x128xf32>
    %275 = arith.addf %272, %274 : vector<24x128xf32>
    %cst_254 = arith.constant 0.000000e+00 : f32
    %276 = vector.broadcast %cst_254 : f32 to vector<24x128xf32>
    %277 = arith.maximumf %275, %276 : vector<24x128xf32>
    %278 = arith.truncf %277 : vector<24x128xf32> to vector<24x128xbf16>
    %cst_255 = arith.constant 0.000000e+00 : f32
    %279 = vector.broadcast %cst_255 : f32 to vector<8x128xf32>
    %c0_256 = arith.constant 0 : index
    %c0_257 = arith.constant 0 : index
    %c0_258 = arith.constant 0 : index
    %280 = vector.load %arg9[%c0_256, %c0_257, %c0_258] : memref<9x8x24xbf16, #tpu.memory_space<vmem>>, vector<1x8x24xbf16>
    %281 = vector.shape_cast %280 : vector<1x8x24xbf16> to vector<8x24xbf16>
    %cst_259 = arith.constant dense<0.000000e+00> : vector<8x128xf32>
    %282 = tpu.matmul %281, %278, %cst_259 {dimension_numbers = #tpu.dot_dimension_numbers<[1], [0], [0], [1], [0, 0, 1, 1], [], []>} : vector<8x24xbf16>, vector<24x128xbf16>, vector<8x128xf32> -> vector<8x128xf32>
    %283 = arith.truncf %282 : vector<8x128xf32> to vector<8x128xbf16>
    %c0_260 = arith.constant 0 : index
    %c0_261 = arith.constant 0 : index
    %c0_262 = arith.constant 0 : index
    %284 = vector.load %arg10[%c0_260, %c0_261, %c0_262] : memref<9x128x128xbf16, #tpu.memory_space<vmem>>, vector<1x128x128xbf16>
    %285 = vector.shape_cast %284 : vector<1x128x128xbf16> to vector<128x128xbf16>
    %cst_263 = arith.constant dense<0.000000e+00> : vector<8x128xf32>
    %286 = tpu.matmul %283, %285, %cst_263 {dimension_numbers = #tpu.dot_dimension_numbers<[1], [0], [0], [1], [0, 0, 1, 1], [], []>} : vector<8x128xbf16>, vector<128x128xbf16>, vector<8x128xf32> -> vector<8x128xf32>
    %287 = arith.addf %279, %286 : vector<8x128xf32>
    %c1_264 = arith.constant 1 : index
    %c0_265 = arith.constant 0 : index
    %c0_266 = arith.constant 0 : index
    %288 = vector.load %arg9[%c1_264, %c0_265, %c0_266] : memref<9x8x24xbf16, #tpu.memory_space<vmem>>, vector<1x8x24xbf16>
    %289 = vector.shape_cast %288 : vector<1x8x24xbf16> to vector<8x24xbf16>
    %cst_267 = arith.constant dense<0.000000e+00> : vector<8x128xf32>
    %290 = tpu.matmul %289, %278, %cst_267 {dimension_numbers = #tpu.dot_dimension_numbers<[1], [0], [0], [1], [0, 0, 1, 1], [], []>} : vector<8x24xbf16>, vector<24x128xbf16>, vector<8x128xf32> -> vector<8x128xf32>
    %291 = arith.truncf %290 : vector<8x128xf32> to vector<8x128xbf16>
    %c1_268 = arith.constant 1 : index
    %c0_269 = arith.constant 0 : index
    %c0_270 = arith.constant 0 : index
    %292 = vector.load %arg10[%c1_268, %c0_269, %c0_270] : memref<9x128x128xbf16, #tpu.memory_space<vmem>>, vector<1x128x128xbf16>
    %293 = vector.shape_cast %292 : vector<1x128x128xbf16> to vector<128x128xbf16>
    %cst_271 = arith.constant dense<0.000000e+00> : vector<8x128xf32>
    %294 = tpu.matmul %291, %293, %cst_271 {dimension_numbers = #tpu.dot_dimension_numbers<[1], [0], [0], [1], [0, 0, 1, 1], [], []>} : vector<8x128xbf16>, vector<128x128xbf16>, vector<8x128xf32> -> vector<8x128xf32>
    %295 = arith.addf %287, %294 : vector<8x128xf32>
    %c2_272 = arith.constant 2 : index
    %c0_273 = arith.constant 0 : index
    %c0_274 = arith.constant 0 : index
    %296 = vector.load %arg9[%c2_272, %c0_273, %c0_274] : memref<9x8x24xbf16, #tpu.memory_space<vmem>>, vector<1x8x24xbf16>
    %297 = vector.shape_cast %296 : vector<1x8x24xbf16> to vector<8x24xbf16>
    %cst_275 = arith.constant dense<0.000000e+00> : vector<8x128xf32>
    %298 = tpu.matmul %297, %278, %cst_275 {dimension_numbers = #tpu.dot_dimension_numbers<[1], [0], [0], [1], [0, 0, 1, 1], [], []>} : vector<8x24xbf16>, vector<24x128xbf16>, vector<8x128xf32> -> vector<8x128xf32>
    %299 = arith.truncf %298 : vector<8x128xf32> to vector<8x128xbf16>
    %c2_276 = arith.constant 2 : index
    %c0_277 = arith.constant 0 : index
    %c0_278 = arith.constant 0 : index
    %300 = vector.load %arg10[%c2_276, %c0_277, %c0_278] : memref<9x128x128xbf16, #tpu.memory_space<vmem>>, vector<1x128x128xbf16>
    %301 = vector.shape_cast %300 : vector<1x128x128xbf16> to vector<128x128xbf16>
    %cst_279 = arith.constant dense<0.000000e+00> : vector<8x128xf32>
    %302 = tpu.matmul %299, %301, %cst_279 {dimension_numbers = #tpu.dot_dimension_numbers<[1], [0], [0], [1], [0, 0, 1, 1], [], []>} : vector<8x128xbf16>, vector<128x128xbf16>, vector<8x128xf32> -> vector<8x128xf32>
    %303 = arith.addf %295, %302 : vector<8x128xf32>
    %c3_280 = arith.constant 3 : index
    %c0_281 = arith.constant 0 : index
    %c0_282 = arith.constant 0 : index
    %304 = vector.load %arg9[%c3_280, %c0_281, %c0_282] : memref<9x8x24xbf16, #tpu.memory_space<vmem>>, vector<1x8x24xbf16>
    %305 = vector.shape_cast %304 : vector<1x8x24xbf16> to vector<8x24xbf16>
    %cst_283 = arith.constant dense<0.000000e+00> : vector<8x128xf32>
    %306 = tpu.matmul %305, %278, %cst_283 {dimension_numbers = #tpu.dot_dimension_numbers<[1], [0], [0], [1], [0, 0, 1, 1], [], []>} : vector<8x24xbf16>, vector<24x128xbf16>, vector<8x128xf32> -> vector<8x128xf32>
    %307 = arith.truncf %306 : vector<8x128xf32> to vector<8x128xbf16>
    %c3_284 = arith.constant 3 : index
    %c0_285 = arith.constant 0 : index
    %c0_286 = arith.constant 0 : index
    %308 = vector.load %arg10[%c3_284, %c0_285, %c0_286] : memref<9x128x128xbf16, #tpu.memory_space<vmem>>, vector<1x128x128xbf16>
    %309 = vector.shape_cast %308 : vector<1x128x128xbf16> to vector<128x128xbf16>
    %cst_287 = arith.constant dense<0.000000e+00> : vector<8x128xf32>
    %310 = tpu.matmul %307, %309, %cst_287 {dimension_numbers = #tpu.dot_dimension_numbers<[1], [0], [0], [1], [0, 0, 1, 1], [], []>} : vector<8x128xbf16>, vector<128x128xbf16>, vector<8x128xf32> -> vector<8x128xf32>
    %311 = arith.addf %303, %310 : vector<8x128xf32>
    %c4_288 = arith.constant 4 : index
    %c0_289 = arith.constant 0 : index
    %c0_290 = arith.constant 0 : index
    %312 = vector.load %arg9[%c4_288, %c0_289, %c0_290] : memref<9x8x24xbf16, #tpu.memory_space<vmem>>, vector<1x8x24xbf16>
    %313 = vector.shape_cast %312 : vector<1x8x24xbf16> to vector<8x24xbf16>
    %cst_291 = arith.constant dense<0.000000e+00> : vector<8x128xf32>
    %314 = tpu.matmul %313, %278, %cst_291 {dimension_numbers = #tpu.dot_dimension_numbers<[1], [0], [0], [1], [0, 0, 1, 1], [], []>} : vector<8x24xbf16>, vector<24x128xbf16>, vector<8x128xf32> -> vector<8x128xf32>
    %315 = arith.truncf %314 : vector<8x128xf32> to vector<8x128xbf16>
    %c4_292 = arith.constant 4 : index
    %c0_293 = arith.constant 0 : index
    %c0_294 = arith.constant 0 : index
    %316 = vector.load %arg10[%c4_292, %c0_293, %c0_294] : memref<9x128x128xbf16, #tpu.memory_space<vmem>>, vector<1x128x128xbf16>
    %317 = vector.shape_cast %316 : vector<1x128x128xbf16> to vector<128x128xbf16>
    %cst_295 = arith.constant dense<0.000000e+00> : vector<8x128xf32>
    %318 = tpu.matmul %315, %317, %cst_295 {dimension_numbers = #tpu.dot_dimension_numbers<[1], [0], [0], [1], [0, 0, 1, 1], [], []>} : vector<8x128xbf16>, vector<128x128xbf16>, vector<8x128xf32> -> vector<8x128xf32>
    %319 = arith.addf %311, %318 : vector<8x128xf32>
    %c5_296 = arith.constant 5 : index
    %c0_297 = arith.constant 0 : index
    %c0_298 = arith.constant 0 : index
    %320 = vector.load %arg9[%c5_296, %c0_297, %c0_298] : memref<9x8x24xbf16, #tpu.memory_space<vmem>>, vector<1x8x24xbf16>
    %321 = vector.shape_cast %320 : vector<1x8x24xbf16> to vector<8x24xbf16>
    %cst_299 = arith.constant dense<0.000000e+00> : vector<8x128xf32>
    %322 = tpu.matmul %321, %278, %cst_299 {dimension_numbers = #tpu.dot_dimension_numbers<[1], [0], [0], [1], [0, 0, 1, 1], [], []>} : vector<8x24xbf16>, vector<24x128xbf16>, vector<8x128xf32> -> vector<8x128xf32>
    %323 = arith.truncf %322 : vector<8x128xf32> to vector<8x128xbf16>
    %c5_300 = arith.constant 5 : index
    %c0_301 = arith.constant 0 : index
    %c0_302 = arith.constant 0 : index
    %324 = vector.load %arg10[%c5_300, %c0_301, %c0_302] : memref<9x128x128xbf16, #tpu.memory_space<vmem>>, vector<1x128x128xbf16>
    %325 = vector.shape_cast %324 : vector<1x128x128xbf16> to vector<128x128xbf16>
    %cst_303 = arith.constant dense<0.000000e+00> : vector<8x128xf32>
    %326 = tpu.matmul %323, %325, %cst_303 {dimension_numbers = #tpu.dot_dimension_numbers<[1], [0], [0], [1], [0, 0, 1, 1], [], []>} : vector<8x128xbf16>, vector<128x128xbf16>, vector<8x128xf32> -> vector<8x128xf32>
    %327 = arith.addf %319, %326 : vector<8x128xf32>
    %c6_304 = arith.constant 6 : index
    %c0_305 = arith.constant 0 : index
    %c0_306 = arith.constant 0 : index
    %328 = vector.load %arg9[%c6_304, %c0_305, %c0_306] : memref<9x8x24xbf16, #tpu.memory_space<vmem>>, vector<1x8x24xbf16>
    %329 = vector.shape_cast %328 : vector<1x8x24xbf16> to vector<8x24xbf16>
    %cst_307 = arith.constant dense<0.000000e+00> : vector<8x128xf32>
    %330 = tpu.matmul %329, %278, %cst_307 {dimension_numbers = #tpu.dot_dimension_numbers<[1], [0], [0], [1], [0, 0, 1, 1], [], []>} : vector<8x24xbf16>, vector<24x128xbf16>, vector<8x128xf32> -> vector<8x128xf32>
    %331 = arith.truncf %330 : vector<8x128xf32> to vector<8x128xbf16>
    %c6_308 = arith.constant 6 : index
    %c0_309 = arith.constant 0 : index
    %c0_310 = arith.constant 0 : index
    %332 = vector.load %arg10[%c6_308, %c0_309, %c0_310] : memref<9x128x128xbf16, #tpu.memory_space<vmem>>, vector<1x128x128xbf16>
    %333 = vector.shape_cast %332 : vector<1x128x128xbf16> to vector<128x128xbf16>
    %cst_311 = arith.constant dense<0.000000e+00> : vector<8x128xf32>
    %334 = tpu.matmul %331, %333, %cst_311 {dimension_numbers = #tpu.dot_dimension_numbers<[1], [0], [0], [1], [0, 0, 1, 1], [], []>} : vector<8x128xbf16>, vector<128x128xbf16>, vector<8x128xf32> -> vector<8x128xf32>
    %335 = arith.addf %327, %334 : vector<8x128xf32>
    %c7_312 = arith.constant 7 : index
    %c0_313 = arith.constant 0 : index
    %c0_314 = arith.constant 0 : index
    %336 = vector.load %arg9[%c7_312, %c0_313, %c0_314] : memref<9x8x24xbf16, #tpu.memory_space<vmem>>, vector<1x8x24xbf16>
    %337 = vector.shape_cast %336 : vector<1x8x24xbf16> to vector<8x24xbf16>
    %cst_315 = arith.constant dense<0.000000e+00> : vector<8x128xf32>
    %338 = tpu.matmul %337, %278, %cst_315 {dimension_numbers = #tpu.dot_dimension_numbers<[1], [0], [0], [1], [0, 0, 1, 1], [], []>} : vector<8x24xbf16>, vector<24x128xbf16>, vector<8x128xf32> -> vector<8x128xf32>
    %339 = arith.truncf %338 : vector<8x128xf32> to vector<8x128xbf16>
    %c7_316 = arith.constant 7 : index
    %c0_317 = arith.constant 0 : index
    %c0_318 = arith.constant 0 : index
    %340 = vector.load %arg10[%c7_316, %c0_317, %c0_318] : memref<9x128x128xbf16, #tpu.memory_space<vmem>>, vector<1x128x128xbf16>
    %341 = vector.shape_cast %340 : vector<1x128x128xbf16> to vector<128x128xbf16>
    %cst_319 = arith.constant dense<0.000000e+00> : vector<8x128xf32>
    %342 = tpu.matmul %339, %341, %cst_319 {dimension_numbers = #tpu.dot_dimension_numbers<[1], [0], [0], [1], [0, 0, 1, 1], [], []>} : vector<8x128xbf16>, vector<128x128xbf16>, vector<8x128xf32> -> vector<8x128xf32>
    %343 = arith.addf %335, %342 : vector<8x128xf32>
    %c8_320 = arith.constant 8 : index
    %c0_321 = arith.constant 0 : index
    %c0_322 = arith.constant 0 : index
    %344 = vector.load %arg9[%c8_320, %c0_321, %c0_322] : memref<9x8x24xbf16, #tpu.memory_space<vmem>>, vector<1x8x24xbf16>
    %345 = vector.shape_cast %344 : vector<1x8x24xbf16> to vector<8x24xbf16>
    %cst_323 = arith.constant dense<0.000000e+00> : vector<8x128xf32>
    %346 = tpu.matmul %345, %278, %cst_323 {dimension_numbers = #tpu.dot_dimension_numbers<[1], [0], [0], [1], [0, 0, 1, 1], [], []>} : vector<8x24xbf16>, vector<24x128xbf16>, vector<8x128xf32> -> vector<8x128xf32>
    %347 = arith.truncf %346 : vector<8x128xf32> to vector<8x128xbf16>
    %c8_324 = arith.constant 8 : index
    %c0_325 = arith.constant 0 : index
    %c0_326 = arith.constant 0 : index
    %348 = vector.load %arg10[%c8_324, %c0_325, %c0_326] : memref<9x128x128xbf16, #tpu.memory_space<vmem>>, vector<1x128x128xbf16>
    %349 = vector.shape_cast %348 : vector<1x128x128xbf16> to vector<128x128xbf16>
    %cst_327 = arith.constant dense<0.000000e+00> : vector<8x128xf32>
    %350 = tpu.matmul %347, %349, %cst_327 {dimension_numbers = #tpu.dot_dimension_numbers<[1], [0], [0], [1], [0, 0, 1, 1], [], []>} : vector<8x128xbf16>, vector<128x128xbf16>, vector<8x128xf32> -> vector<8x128xf32>
    %351 = arith.addf %343, %350 : vector<8x128xf32>
    %c0_328 = arith.constant 0 : index
    %c0_329 = arith.constant 0 : index
    %352 = vector.load %arg11[%c0_328, %c0_329] : memref<1x128xf32, #tpu.memory_space<vmem>>, vector<1x128xf32>
    %353 = vector.broadcast %352 : vector<1x128xf32> to vector<8x128xf32>
    %354 = arith.addf %351, %353 : vector<8x128xf32>
    %c0_330 = arith.constant 0 : index
    %c0_331 = arith.constant 0 : index
    %355 = vector.load %arg12[%c0_330, %c0_331] : memref<8x128xf32, #tpu.memory_space<vmem>>, vector<8x128xf32>
    tpu.vector_store %arg12[%c0_330, %c0_331], %354 {strides = array<i32>} : memref<8x128xf32, #tpu.memory_space<vmem>>, vector<8x128xf32>,
    return
  }
}

</mosaic_0001>

<llo_original>
// kernel: encoder_forward.1
$region0: #{encoder_forward.1}
  #allocation0 [shape = 'u32[]', space=smem, size = 0x4, offset = 0x4, fixed_abs, tag = 'smem constant byte address 0x4 - core index']
  #allocation1 [shape = 'u32[144,128]{1,0:T(1,128)}', space=vmem, size = 0x12000, scoped, tag = 'internal scratch']
  %s0 = inlined_call_operand.vmem [shape: bf16[392,16], index: 0, kind: input, shape index: {}]
  %s1 = inlined_call_operand.vmem [shape: bf16[16,128], index: 1, kind: input, shape index: {}]
  %s2 = inlined_call_operand.vmem [shape: f32[1,128], index: 2, kind: input, shape index: {}]
  %s3 = inlined_call_operand.vmem [shape: bf16[16,104,392], index: 3, kind: input, shape index: {}]
  %s4 = inlined_call_operand.vmem [shape: bf16[16,128,128], index: 4, kind: input, shape index: {}]
  %s5 = inlined_call_operand.vmem [shape: f32[1,128], index: 5, kind: input, shape index: {}]
  %s6 = inlined_call_operand.vmem [shape: bf16[16,24,104], index: 6, kind: input, shape index: {}]
  %s7 = inlined_call_operand.vmem [shape: bf16[16,128,128], index: 7, kind: input, shape index: {}]
  %s8 = inlined_call_operand.vmem [shape: f32[1,128], index: 8, kind: input, shape index: {}]
  %s9 = inlined_call_operand.vmem [shape: bf16[9,8,24], index: 9, kind: input, shape index: {}]
  %s10 = inlined_call_operand.vmem [shape: bf16[9,128,128], index: 10, kind: input, shape index: {}]
  %s11 = inlined_call_operand.vmem [shape: f32[1,128], index: 11, kind: input, shape index: {}]
  %s12 = inlined_call_operand.vmem [shape: f32[8,128], index: 12, kind: output, shape index: {}]
  %s13 = sld [smem:[#allocation0]]
  $region58: #{encoder_forward.1} parent=0
    _
  %s15 = ssub.s32 1, %s13
  %s16 = scalar_select 0, %s15, %s13
  // Predicated region
  $region2: #{encoder_forward.1} parent=0 // pred_check
    _
  $region3: #{encoder_forward.1} parent=0 // pred_check_branch
    %18 = sbr.rel (0) target = $region5
  $region4: #{encoder_forward.1} parent=0 // pred_region
    _
  $region5: #{encoder_forward.1} parent=0 // pred_fallthru
    _
  // Predicated region
  $region6: #{encoder_forward.1} parent=0 // pred_check
    _
  $region7: #{encoder_forward.1} parent=0 // pred_check_branch
    %20 = sbr.rel (0) target = $region9
  $region8: #{encoder_forward.1} parent=0 // pred_region
    _
  $region9: #{encoder_forward.1} parent=0 // pred_fallthru
    _
  // Predicated region
  $region10: #{encoder_forward.1} parent=0 // pred_check
    _
  $region11: #{encoder_forward.1} parent=0 // pred_check_branch
    %22 = sbr.rel (0) target = $region13
  $region12: #{encoder_forward.1} parent=0 // pred_region
    _
  $region13: #{encoder_forward.1} parent=0 // pred_fallthru
    _
  // Predicated region
  $region14: #{encoder_forward.1} parent=0 // pred_check
    _
  $region15: #{encoder_forward.1} parent=0 // pred_check_branch
    %24 = sbr.rel (0) target = $region17
  $region16: #{encoder_forward.1} parent=0 // pred_region
    _
  $region17: #{encoder_forward.1} parent=0 // pred_fallthru
    _
  // Predicated region
  $region18: #{encoder_forward.1} parent=0 // pred_check
    _
  $region19: #{encoder_forward.1} parent=0 // pred_check_branch
    %26 = sbr.rel (0) target = $region21
  $region20: #{encoder_forward.1} parent=0 // pred_region
    _
  $region21: #{encoder_forward.1} parent=0 // pred_fallthru
    _
  // Predicated region
  $region22: #{encoder_forward.1} parent=0 // pred_check
    _
  $region23: #{encoder_forward.1} parent=0 // pred_check_branch
    %28 = sbr.rel (0) target = $region25
  $region24: #{encoder_forward.1} parent=0 // pred_region
    _
  $region25: #{encoder_forward.1} parent=0 // pred_fallthru
    _
  // Predicated region
  $region26: #{encoder_forward.1} parent=0 // pred_check
    _
  $region27: #{encoder_forward.1} parent=0 // pred_check_branch
    %30 = sbr.rel (0) target = $region29
  $region28: #{encoder_forward.1} parent=0 // pred_region
    _
  $region29: #{encoder_forward.1} parent=0 // pred_fallthru
    _
  // Predicated region
  $region30: #{encoder_forward.1} parent=0 // pred_check
    _
  $region31: #{encoder_forward.1} parent=0 // pred_check_branch
    %32 = sbr.rel (0) target = $region33
  $region32: #{encoder_forward.1} parent=0 // pred_region
    _
  $region33: #{encoder_forward.1} parent=0 // pred_fallthru
    _
  // Predicated region
  $region34: #{encoder_forward.1} parent=0 // pred_check
    _
  $region35: #{encoder_forward.1} parent=0 // pred_check_branch
    %34 = sbr.rel (0) target = $region37
  $region36: #{encoder_forward.1} parent=0 // pred_region
    _
  $region37: #{encoder_forward.1} parent=0 // pred_fallthru
    _
  // Predicated region
  $region38: #{encoder_forward.1} parent=0 // pred_check
    _
  $region39: #{encoder_forward.1} parent=0 // pred_check_branch
    %36 = sbr.rel (0) target = $region41
  $region40: #{encoder_forward.1} parent=0 // pred_region
    _
  $region41: #{encoder_forward.1} parent=0 // pred_fallthru
    _
  // Predicated region
  $region42: #{encoder_forward.1} parent=0 // pred_check
    _
  $region43: #{encoder_forward.1} parent=0 // pred_check_branch
    %38 = sbr.rel (0) target = $region45
  $region44: #{encoder_forward.1} parent=0 // pred_region
    _
  $region45: #{encoder_forward.1} parent=0 // pred_fallthru
    _
  // Predicated region
  $region46: #{encoder_forward.1} parent=0 // pred_check
    _
  $region47: #{encoder_forward.1} parent=0 // pred_check_branch
    %40 = sbr.rel (0) target = $region49
  $region48: #{encoder_forward.1} parent=0 // pred_region
    _
  $region49: #{encoder_forward.1} parent=0 // pred_fallthru
    _
  %v42 = vld [vmem:[%s0] sm:$0xf]
  %v43 = vld [vmem:[%s0 + $0x4] sm:$0xf]
  %v44 = vld [vmem:[%s0 + $0x8] sm:$0xf]
  %v45 = vld [vmem:[%s0 + $0xc] sm:$0xf]
  %v46 = vld [vmem:[%s0 + $0x10] sm:$0xf]
  %v47 = vld [vmem:[%s0 + $0x14] sm:$0xf]
  %v48 = vld [vmem:[%s0 + $0x18] sm:$0xf]
  %v49 = vld [vmem:[%s0 + $0x1c] sm:$0xf]
  %v50 = vld [vmem:[%s0 + $0x20] sm:$0xf]
  %v51 = vld [vmem:[%s0 + $0x24] sm:$0xf]
  %v52 = vld [vmem:[%s0 + $0x28] sm:$0xf]
  %v53 = vld [vmem:[%s0 + $0x2c] sm:$0xf]
  %v54 = vld [vmem:[%s0 + $0x30] sm:$0xf]
  %v55 = vld [vmem:[%s0 + $0x34] sm:$0xf]
  %v56 = vld [vmem:[%s0 + $0x38] sm:$0xf]
  %v57 = vld [vmem:[%s0 + $0x3c] sm:$0xf]
  %v58 = vld [vmem:[%s0 + $0x40] sm:$0xf]
  %v59 = vld [vmem:[%s0 + $0x44] sm:$0xf]
  %v60 = vld [vmem:[%s0 + $0x48] sm:$0xf]
  %v61 = vld [vmem:[%s0 + $0x4c] sm:$0xf]
  %v62 = vld [vmem:[%s0 + $0x50] sm:$0xf]
  %v63 = vld [vmem:[%s0 + $0x54] sm:$0xf]
  %v64 = vld [vmem:[%s0 + $0x58] sm:$0xf]
  %v65 = vld [vmem:[%s0 + $0x5c] sm:$0xf]
  %v66 = vld [vmem:[%s0 + $0x60] sm:$0xf]
  %v67 = vld [vmem:[%s0 + $0x64] sm:$0xf]
  %v68 = vld [vmem:[%s0 + $0x68] sm:$0xf]
  %v69 = vld [vmem:[%s0 + $0x6c] sm:$0xf]
  %v70 = vld [vmem:[%s0 + $0x70] sm:$0xf]
  %v71 = vld [vmem:[%s0 + $0x74] sm:$0xf]
  %v72 = vld [vmem:[%s0 + $0x78] sm:$0xf]
  %v73 = vld [vmem:[%s0 + $0x7c] sm:$0xf]
  %v74 = vld [vmem:[%s0 + $0x80] sm:$0xf]
  %v75 = vld [vmem:[%s0 + $0x84] sm:$0xf]
  %v76 = vld [vmem:[%s0 + $0x88] sm:$0xf]
  %v77 = vld [vmem:[%s0 + $0x8c] sm:$0xf]
  %v78 = vld [vmem:[%s0 + $0x90] sm:$0xf]
  %v79 = vld [vmem:[%s0 + $0x94] sm:$0xf]
  %v80 = vld [vmem:[%s0 + $0x98] sm:$0xf]
  %v81 = vld [vmem:[%s0 + $0x9c] sm:$0xf]
  %v82 = vld [vmem:[%s0 + $0xa0] sm:$0xf]
  %v83 = vld [vmem:[%s0 + $0xa4] sm:$0xf]
  %v84 = vld [vmem:[%s0 + $0xa8] sm:$0xf]
  %v85 = vld [vmem:[%s0 + $0xac] sm:$0xf]
  %v86 = vld [vmem:[%s0 + $0xb0] sm:$0xf]
  %v87 = vld [vmem:[%s0 + $0xb4] sm:$0xf]
  %v88 = vld [vmem:[%s0 + $0xb8] sm:$0xf]
  %v89 = vld [vmem:[%s0 + $0xbc] sm:$0xf]
  %v90 = vld [vmem:[%s0 + $0xc0] sm:$0xf]
  %v91 = vld [vmem:[%s1] sm:$0xf]
  %v92 = vld [vmem:[%s1 + $0x4] sm:$0xf]
  %v93 = vld [vmem:[%s2] sm:$0x1]
  %v95 = vlaneseq
  %v96 = vshrl.u32 %v95, 7
  %v97 = vsub.s32 0, %v96
  %v98 = vrot.slane %v93, %v97
  %v149 = vunpack.c.l.b16 %v42
  %v150 = vunpack.c.l.b16 %v43
  %v151 = vunpack.c.l.b16 %v44
  %v152 = vunpack.c.l.b16 %v45
  %v153 = vunpack.c.l.b16 %v46
  %v154 = vunpack.c.l.b16 %v47
  %v155 = vunpack.c.l.b16 %v48
  %v156 = vunpack.c.l.b16 %v49
  %v157 = vunpack.c.l.b16 %v50
  %v158 = vunpack.c.l.b16 %v51
  %v159 = vunpack.c.l.b16 %v52
  %v160 = vunpack.c.l.b16 %v53
  %v161 = vunpack.c.l.b16 %v54
  %v162 = vunpack.c.l.b16 %v55
  %v163 = vunpack.c.l.b16 %v56
  %v164 = vunpack.c.l.b16 %v57
  %v165 = vunpack.c.l.b16 %v58
  %v166 = vunpack.c.l.b16 %v59
  %v167 = vunpack.c.l.b16 %v60
  %v168 = vunpack.c.l.b16 %v61
  %v169 = vunpack.c.l.b16 %v62
  %v170 = vunpack.c.l.b16 %v63
  %v171 = vunpack.c.l.b16 %v64
  %v172 = vunpack.c.l.b16 %v65
  %v173 = vunpack.c.l.b16 %v66
  %v174 = vunpack.c.l.b16 %v67
  %v175 = vunpack.c.l.b16 %v68
  %v176 = vunpack.c.l.b16 %v69
  %v177 = vunpack.c.l.b16 %v70
  %v178 = vunpack.c.l.b16 %v71
  %v179 = vunpack.c.l.b16 %v72
  %v180 = vunpack.c.l.b16 %v73
  %v181 = vunpack.c.l.b16 %v74
  %v182 = vunpack.c.l.b16 %v75
  %v183 = vunpack.c.l.b16 %v76
  %v184 = vunpack.c.l.b16 %v77
  %v185 = vunpack.c.l.b16 %v78
  %v186 = vunpack.c.l.b16 %v79
  %v187 = vunpack.c.l.b16 %v80
  %v188 = vunpack.c.l.b16 %v81
  %v189 = vunpack.c.l.b16 %v82
  %v190 = vunpack.c.l.b16 %v83
  %v191 = vunpack.c.l.b16 %v84
  %v192 = vunpack.c.l.b16 %v85
  %v193 = vunpack.c.l.b16 %v86
  %v194 = vunpack.c.l.b16 %v87
  %v195 = vunpack.c.l.b16 %v88
  %v196 = vunpack.c.l.b16 %v89
  %v197 = vunpack.c.l.b16 %v90
  %v198 = vpack.c.b16 %v150, %v149
  %v199 = vpack.c.b16 %v152, %v151
  %v200 = vpack.c.b16 %v154, %v153
  %v201 = vpack.c.b16 %v156, %v155
  %v202 = vpack.c.b16 %v158, %v157
  %v203 = vpack.c.b16 %v160, %v159
  %v204 = vpack.c.b16 %v162, %v161
  %v205 = vpack.c.b16 %v164, %v163
  %v206 = vpack.c.b16 %v166, %v165
  %v207 = vpack.c.b16 %v168, %v167
  %v208 = vpack.c.b16 %v170, %v169
  %v209 = vpack.c.b16 %v172, %v171
  %v210 = vpack.c.b16 %v174, %v173
  %v211 = vpack.c.b16 %v176, %v175
  %v212 = vpack.c.b16 %v178, %v177
  %v213 = vpack.c.b16 %v180, %v179
  %v214 = vpack.c.b16 %v182, %v181
  %v215 = vpack.c.b16 %v184, %v183
  %v216 = vpack.c.b16 %v186, %v185
  %v217 = vpack.c.b16 %v188, %v187
  %v218 = vpack.c.b16 %v190, %v189
  %v219 = vpack.c.b16 %v192, %v191
  %v220 = vpack.c.b16 %v194, %v193
  %v221 = vpack.c.b16 %v196, %v195
  %v222 = vpack.c.b16 %v197, %v197
  %v225 = vunpack.c.l.b16 %v91
  %v226 = vunpack.c.l.b16 %v92
  %v227 = vpack.c.b16 %v226, %v225
  %vm229 = vcmask 130048
  %v231 = vsel %vm229, %v198, 0
  %v234 = vsel %vm229, %v199, 0
  %v237 = vsel %vm229, %v200, 0
  %v240 = vsel %vm229, %v201, 0
  %v243 = vsel %vm229, %v202, 0
  %v246 = vsel %vm229, %v203, 0
  %v249 = vsel %vm229, %v204, 0
  %v252 = vsel %vm229, %v205, 0
  %v255 = vsel %vm229, %v206, 0
  %v258 = vsel %vm229, %v207, 0
  %v261 = vsel %vm229, %v208, 0
  %v264 = vsel %vm229, %v209, 0
  %v267 = vsel %vm229, %v210, 0
  %v270 = vsel %vm229, %v211, 0
  %v273 = vsel %vm229, %v212, 0
  %v276 = vsel %vm229, %v213, 0
  %v279 = vsel %vm229, %v214, 0
  %v282 = vsel %vm229, %v215, 0
  %v285 = vsel %vm229, %v216, 0
  %v288 = vsel %vm229, %v217, 0
  %v291 = vsel %vm229, %v218, 0
  %v294 = vsel %vm229, %v219, 0
  %v297 = vsel %vm229, %v220, 0
  %v300 = vsel %vm229, %v221, 0
  %v303 = vsel %vm229, %v222, 0
  %305 = vmatprep.subr.bf16.mxu0 0
  %306 = vmatpush1.bf16.msra.mxu0 %v227
  %307 = vmatprep.subr.bf16.mxu0 0
  %308 = vmatpush1.bf16.msra.mxu0 0
  %309 = vmatprep.subr.bf16.mxu0 0
  %310 = vmatpush1.bf16.msra.mxu0 0
  %311 = vmatprep.subr.bf16.mxu0 0
  %312 = vmatpush1.bf16.msra.mxu0 0
  %313 = vmatprep.subr.bf16.mxu0 0
  %314 = vmatpush1.bf16.msra.mxu0 0
  %315 = vmatprep.subr.bf16.mxu0 0
  %316 = vmatpush1.bf16.msra.mxu0 0
  %317 = vmatprep.subr.bf16.mxu0 0
  %318 = vmatpush1.bf16.msra.mxu0 0
  %319 = vmatprep.subr.bf16.mxu0 0
  %320 = vmatpush1.bf16.msra.mxu0 0
  %321 = vmatprep.subr.bf16.mxu0 0
  %322 = vmatpush1.bf16.msra.mxu0 0
  %323 = vmatprep.subr.bf16.mxu0 0
  %324 = vmatpush1.bf16.msra.mxu0 0
  %325 = vmatprep.subr.bf16.mxu0 0
  %326 = vmatpush1.bf16.msra.mxu0 0
  %327 = vmatprep.subr.bf16.mxu0 0
  %328 = vmatpush1.bf16.msra.mxu0 0
  %329 = vmatprep.subr.bf16.mxu0 0
  %330 = vmatpush1.bf16.msra.mxu0 0
  %331 = vmatprep.subr.bf16.mxu0 0
  %332 = vmatpush1.bf16.msra.mxu0 0
  %333 = vmatprep.subr.bf16.mxu0 0
  %334 = vmatpush1.bf16.msra.mxu0 0
  %335 = vmatprep.subr.bf16.mxu0 0
  %336 = vmatpush1.bf16.msra.mxu0 0
  %337 = vmatprep.mubr.bf16.mxu0 0
  %338 = vmatmul.mubr.bf16.gmra.mrb[0].mxu0 %v231
  %v339 = vpop.f32.mrb[0].mxu0
  %v340 = vadd.f32 %v98, %v339
  %v341 = vpop.f32.mrb[0].mxu0
  %v342 = vpop.f32.mrb[0].mxu0
  %v343 = vadd.f32 %v98, %v342
  %v344 = vpop.f32.mrb[0].mxu0
  %345 = vmatprep.mubr.bf16.mxu0 0
  %346 = vmatmul.mubr.bf16.gmra.mrb[0].mxu0 %v234
  %v347 = vpop.f32.mrb[0].mxu0
  %v348 = vadd.f32 %v98, %v347
  %v349 = vpop.f32.mrb[0].mxu0
  %v350 = vpop.f32.mrb[0].mxu0
  %v351 = vadd.f32 %v98, %v350
  %v352 = vpop.f32.mrb[0].mxu0
  %353 = vmatprep.mubr.bf16.mxu0 0
  %354 = vmatmul.mubr.bf16.gmra.mrb[0].mxu0 %v237
  %v355 = vpop.f32.mrb[0].mxu0
  %v356 = vadd.f32 %v98, %v355
  %v357 = vpop.f32.mrb[0].mxu0
  %v358 = vpop.f32.mrb[0].mxu0
  %v359 = vadd.f32 %v98, %v358
  %v360 = vpop.f32.mrb[0].mxu0
  %361 = vmatprep.mubr.bf16.mxu0 0
  %362 = vmatmul.mubr.bf16.gmra.mrb[0].mxu0 %v240
  %v363 = vpop.f32.mrb[0].mxu0
  %v364 = vadd.f32 %v98, %v363
  %v365 = vpop.f32.mrb[0].mxu0
  %v366 = vpop.f32.mrb[0].mxu0
  %v367 = vadd.f32 %v98, %v366
  %v368 = vpop.f32.mrb[0].mxu0
  %369 = vmatprep.mubr.bf16.mxu0 0
  %370 = vmatmul.mubr.bf16.gmra.mrb[0].mxu0 %v243
  %v371 = vpop.f32.mrb[0].mxu0
  %v372 = vadd.f32 %v98, %v371
  %v373 = vpop.f32.mrb[0].mxu0
  %v374 = vpop.f32.mrb[0].mxu0
  %v375 = vadd.f32 %v98, %v374
  %v376 = vpop.f32.mrb[0].mxu0
  %377 = vmatprep.mubr.bf16.mxu0 0
  %378 = vmatmul.mubr.bf16.gmra.mrb[0].mxu0 %v246
  %v379 = vpop.f32.mrb[0].mxu0
  %v380 = vadd.f32 %v98, %v379
  %v381 = vpop.f32.mrb[0].mxu0
  %v382 = vpop.f32.mrb[0].mxu0
  %v383 = vadd.f32 %v98, %v382
  %v384 = vpop.f32.mrb[0].mxu0
  %385 = vmatprep.mubr.bf16.mxu0 0
  %386 = vmatmul.mubr.bf16.gmra.mrb[0].mxu0 %v249
  %v387 = vpop.f32.mrb[0].mxu0
  %v388 = vadd.f32 %v98, %v387
  %v389 = vpop.f32.mrb[0].mxu0
  %v390 = vpop.f32.mrb[0].mxu0
  %v391 = vadd.f32 %v98, %v390
  %v392 = vpop.f32.mrb[0].mxu0
  %393 = vmatprep.mubr.bf16.mxu0 0
  %394 = vmatmul.mubr.bf16.gmra.mrb[0].mxu0 %v252
  %v395 = vpop.f32.mrb[0].mxu0
  %v396 = vadd.f32 %v98, %v395
  %v397 = vpop.f32.mrb[0].mxu0
  %v398 = vpop.f32.mrb[0].mxu0
  %v399 = vadd.f32 %v98, %v398
  %v400 = vpop.f32.mrb[0].mxu0
  %401 = vmatprep.mubr.bf16.mxu0 0
  %402 = vmatmul.mubr.bf16.gmra.mrb[0].mxu0 %v255
  %v403 = vpop.f32.mrb[0].mxu0
  %v404 = vadd.f32 %v98, %v403
  %v405 = vpop.f32.mrb[0].mxu0
  %v406 = vpop.f32.mrb[0].mxu0
  %v407 = vadd.f32 %v98, %v406
  %v408 = vpop.f32.mrb[0].mxu0
  %409 = vmatprep.mubr.bf16.mxu0 0
  %410 = vmatmul.mubr.bf16.gmra.mrb[0].mxu0 %v258
  %v411 = vpop.f32.mrb[0].mxu0
  %v412 = vadd.f32 %v98, %v411
  %v413 = vpop.f32.mrb[0].mxu0
  %v414 = vpop.f32.mrb[0].mxu0
  %v415 = vadd.f32 %v98, %v414
  %v416 = vpop.f32.mrb[0].mxu0
  %417 = vmatprep.mubr.bf16.mxu0 0
  %418 = vmatmul.mubr.bf16.gmra.mrb[0].mxu0 %v261
  %v419 = vpop.f32.mrb[0].mxu0
  %v420 = vadd.f32 %v98, %v419
  %v421 = vpop.f32.mrb[0].mxu0
  %v422 = vpop.f32.mrb[0].mxu0
  %v423 = vadd.f32 %v98, %v422
  %v424 = vpop.f32.mrb[0].mxu0
  %425 = vmatprep.mubr.bf16.mxu0 0
  %426 = vmatmul.mubr.bf16.gmra.mrb[0].mxu0 %v264
  %v427 = vpop.f32.mrb[0].mxu0
  %v428 = vadd.f32 %v98, %v427
  %v429 = vpop.f32.mrb[0].mxu0
  %v430 = vpop.f32.mrb[0].mxu0
  %v431 = vadd.f32 %v98, %v430
  %v432 = vpop.f32.mrb[0].mxu0
  %433 = vmatprep.mubr.bf16.mxu0 0
  %434 = vmatmul.mubr.bf16.gmra.mrb[0].mxu0 %v267
  %v435 = vpop.f32.mrb[0].mxu0
  %v436 = vadd.f32 %v98, %v435
  %v437 = vpop.f32.mrb[0].mxu0
  %v438 = vpop.f32.mrb[0].mxu0
  %v439 = vadd.f32 %v98, %v438
  %v440 = vpop.f32.mrb[0].mxu0
  %441 = vmatprep.mubr.bf16.mxu0 0
  %442 = vmatmul.mubr.bf16.gmra.mrb[0].mxu0 %v270
  %v443 = vpop.f32.mrb[0].mxu0
  %v444 = vadd.f32 %v98, %v443
  %v445 = vpop.f32.mrb[0].mxu0
  %v446 = vpop.f32.mrb[0].mxu0
  %v447 = vadd.f32 %v98, %v446
  %v448 = vpop.f32.mrb[0].mxu0
  %449 = vmatprep.mubr.bf16.mxu0 0
  %450 = vmatmul.mubr.bf16.gmra.mrb[0].mxu0 %v273
  %v451 = vpop.f32.mrb[0].mxu0
  %v452 = vadd.f32 %v98, %v451
  %v453 = vpop.f32.mrb[0].mxu0
  %v454 = vpop.f32.mrb[0].mxu0
  %v455 = vadd.f32 %v98, %v454
  %v456 = vpop.f32.mrb[0].mxu0
  %457 = vmatprep.mubr.bf16.mxu0 0
  %458 = vmatmul.mubr.bf16.gmra.mrb[0].mxu0 %v276
  %v459 = vpop.f32.mrb[0].mxu0
  %v460 = vadd.f32 %v98, %v459
  %v461 = vpop.f32.mrb[0].mxu0
  %v462 = vpop.f32.mrb[0].mxu0
  %v463 = vadd.f32 %v98, %v462
  %v464 = vpop.f32.mrb[0].mxu0
  %465 = vmatprep.mubr.bf16.mxu0 0
  %466 = vmatmul.mubr.bf16.gmra.mrb[0].mxu0 %v279
  %v467 = vpop.f32.mrb[0].mxu0
  %v468 = vadd.f32 %v98, %v467
  %v469 = vpop.f32.mrb[0].mxu0
  %v470 = vpop.f32.mrb[0].mxu0
  %v471 = vadd.f32 %v98, %v470
  %v472 = vpop.f32.mrb[0].mxu0
  %473 = vmatprep.mubr.bf16.mxu0 0
  %474 = vmatmul.mubr.bf16.gmra.mrb[0].mxu0 %v282
  %v475 = vpop.f32.mrb[0].mxu0
  %v476 = vadd.f32 %v98, %v475
  %v477 = vpop.f32.mrb[0].mxu0
  %v478 = vpop.f32.mrb[0].mxu0
  %v479 = vadd.f32 %v98, %v478
  %v480 = vpop.f32.mrb[0].mxu0
  %481 = vmatprep.mubr.bf16.mxu0 0
  %482 = vmatmul.mubr.bf16.gmra.mrb[0].mxu0 %v285
  %v483 = vpop.f32.mrb[0].mxu0
  %v484 = vadd.f32 %v98, %v483
  %v485 = vpop.f32.mrb[0].mxu0
  %v486 = vpop.f32.mrb[0].mxu0
  %v487 = vadd.f32 %v98, %v486
  %v488 = vpop.f32.mrb[0].mxu0
  %489 = vmatprep.mubr.bf16.mxu0 0
  %490 = vmatmul.mubr.bf16.gmra.mrb[0].mxu0 %v288
  %v491 = vpop.f32.mrb[0].mxu0
  %v492 = vadd.f32 %v98, %v491
  %v493 = vpop.f32.mrb[0].mxu0
  %v494 = vpop.f32.mrb[0].mxu0
  %v495 = vadd.f32 %v98, %v494
  %v496 = vpop.f32.mrb[0].mxu0
  %497 = vmatprep.mubr.bf16.mxu0 0
  %498 = vmatmul.mubr.bf16.gmra.mrb[0].mxu0 %v291
  %v499 = vpop.f32.mrb[0].mxu0
  %v500 = vadd.f32 %v98, %v499
  %v501 = vpop.f32.mrb[0].mxu0
  %v502 = vpop.f32.mrb[0].mxu0
  %v503 = vadd.f32 %v98, %v502
  %v504 = vpop.f32.mrb[0].mxu0
  %505 = vmatprep.mubr.bf16.mxu0 0
  %506 = vmatmul.mubr.bf16.gmra.mrb[0].mxu0 %v294
  %v507 = vpop.f32.mrb[0].mxu0
  %v508 = vadd.f32 %v98, %v507
  %v509 = vpop.f32.mrb[0].mxu0
  %v510 = vpop.f32.mrb[0].mxu0
  %v511 = vadd.f32 %v98, %v510
  %v512 = vpop.f32.mrb[0].mxu0
  %513 = vmatprep.mubr.bf16.mxu0 0
  %514 = vmatmul.mubr.bf16.gmra.mrb[0].mxu0 %v297
  %v515 = vpop.f32.mrb[0].mxu0
  %v516 = vadd.f32 %v98, %v515
  %v517 = vpop.f32.mrb[0].mxu0
  %v518 = vpop.f32.mrb[0].mxu0
  %v519 = vadd.f32 %v98, %v518
  %v520 = vpop.f32.mrb[0].mxu0
  %521 = vmatprep.mubr.bf16.mxu0 0
  %522 = vmatmul.mubr.bf16.gmra.mrb[0].mxu0 %v300
  %v523 = vpop.f32.mrb[0].mxu0
  %v524 = vadd.f32 %v98, %v523
  %v525 = vpop.f32.mrb[0].mxu0
  %v526 = vpop.f32.mrb[0].mxu0
  %v527 = vadd.f32 %v98, %v526
  %v528 = vpop.f32.mrb[0].mxu0
  %529 = vmatprep.mubr.bf16.mxu0 0
  %530 = vmatmul.mubr.bf16.gmra.mrb[0].mxu0 %v303
  %v531 = vpop.f32.mrb[0].mxu0
  %v532 = vadd.f32 %v98, %v531
  %v533 = vpop.f32.mrb[0].mxu0
  %v534 = vpop.f32.mrb[0].mxu0
  %v535 = vpop.f32.mrb[0].mxu0
  %536 = vdwg.mxu0
  %v537 = vmax.f32 %v340, 0.0
  %v538 = vmax.f32 %v343, 0.0
  %v539 = vmax.f32 %v348, 0.0
  %v540 = vmax.f32 %v351, 0.0
  %v541 = vmax.f32 %v356, 0.0
  %v542 = vmax.f32 %v359, 0.0
  %v543 = vmax.f32 %v364, 0.0
  %v544 = vmax.f32 %v367, 0.0
  %v545 = vmax.f32 %v372, 0.0
  %v546 = vmax.f32 %v375, 0.0
  %v547 = vmax.f32 %v380, 0.0
  %v548 = vmax.f32 %v383, 0.0
  %v549 = vmax.f32 %v388, 0.0
  %v550 = vmax.f32 %v391, 0.0
  %v551 = vmax.f32 %v396, 0.0
  %v552 = vmax.f32 %v399, 0.0
  %v553 = vmax.f32 %v404, 0.0
  %v554 = vmax.f32 %v407, 0.0
  %v555 = vmax.f32 %v412, 0.0
  %v556 = vmax.f32 %v415, 0.0
  %v557 = vmax.f32 %v420, 0.0
  %v558 = vmax.f32 %v423, 0.0
  %v559 = vmax.f32 %v428, 0.0
  %v560 = vmax.f32 %v431, 0.0
  %v561 = vmax.f32 %v436, 0.0
  %v562 = vmax.f32 %v439, 0.0
  %v563 = vmax.f32 %v444, 0.0
  %v564 = vmax.f32 %v447, 0.0
  %v565 = vmax.f32 %v452, 0.0
  %v566 = vmax.f32 %v455, 0.0
  %v567 = vmax.f32 %v460, 0.0
  %v568 = vmax.f32 %v463, 0.0
  %v569 = vmax.f32 %v468, 0.0
  %v570 = vmax.f32 %v471, 0.0
  %v571 = vmax.f32 %v476, 0.0
  %v572 = vmax.f32 %v479, 0.0
  %v573 = vmax.f32 %v484, 0.0
  %v574 = vmax.f32 %v487, 0.0
  %v575 = vmax.f32 %v492, 0.0
  %v576 = vmax.f32 %v495, 0.0
  %v577 = vmax.f32 %v500, 0.0
  %v578 = vmax.f32 %v503, 0.0
  %v579 = vmax.f32 %v508, 0.0
  %v580 = vmax.f32 %v511, 0.0
  %v581 = vmax.f32 %v516, 0.0
  %v582 = vmax.f32 %v519, 0.0
  %v583 = vmax.f32 %v524, 0.0
  %v584 = vmax.f32 %v527, 0.0
  %v585 = vmax.f32 %v532, 0.0
  %v586 = vpack.c.bf16 %v538, %v537
  %v587 = vpack.c.bf16 %v540, %v539
  %v588 = vpack.c.bf16 %v542, %v541
  %v589 = vpack.c.bf16 %v544, %v543
  %v590 = vpack.c.bf16 %v546, %v545
  %v591 = vpack.c.bf16 %v548, %v547
  %v592 = vpack.c.bf16 %v550, %v549
  %v593 = vpack.c.bf16 %v552, %v551
  %v594 = vpack.c.bf16 %v554, %v553
  %v595 = vpack.c.bf16 %v556, %v555
  %v596 = vpack.c.bf16 %v558, %v557
  %v597 = vpack.c.bf16 %v560, %v559
  %v598 = vpack.c.bf16 %v562, %v561
  %v599 = vpack.c.bf16 %v564, %v563
  %v600 = vpack.c.bf16 %v566, %v565
  %v601 = vpack.c.bf16 %v568, %v567
  %v602 = vpack.c.bf16 %v570, %v569
  %v603 = vpack.c.bf16 %v572, %v571
  %v604 = vpack.c.bf16 %v574, %v573
  %v605 = vpack.c.bf16 %v576, %v575
  %v606 = vpack.c.bf16 %v578, %v577
  %v607 = vpack.c.bf16 %v580, %v579
  %v608 = vpack.c.bf16 %v582, %v581
  %v609 = vpack.c.bf16 %v584, %v583
  %v610 = vpack.c.bf16 %v585, %v585
  %v611 = vld [vmem:[%s3] sm:$0xff]
  %v612 = vld [vmem:[%s3 + $0x8] sm:$0xff]
  %v613 = vld [vmem:[%s3 + $0x10] sm:$0xff]
  %v614 = vld [vmem:[%s3 + $0x18] sm:$0xff]
  %v615 = vld [vmem:[%s3 + $0x20] sm:$0xff]
  %v616 = vld [vmem:[%s3 + $0x28] sm:$0xff]
  %v617 = vld [vmem:[%s3 + $0x30] sm:$0xff]
  %v618 = vld [vmem:[%s3 + $0x38] sm:$0xff]
  %v619 = vld [vmem:[%s3 + $0x40] sm:$0xff]
  %v620 = vld [vmem:[%s3 + $0x48] sm:$0xff]
  %v621 = vld [vmem:[%s3 + $0x50] sm:$0xff]
  %v622 = vld [vmem:[%s3 + $0x58] sm:$0xff]
  %v623 = vld [vmem:[%s3 + $0x60] sm:$0xff]
  %v624 = vld [vmem:[%s3 + $0x68] sm:$0xff]
  %v625 = vld [vmem:[%s3 + $0x70] sm:$0xff]
  %v626 = vld [vmem:[%s3 + $0x78] sm:$0xff]
  %v627 = vld [vmem:[%s3 + $0x80] sm:$0xff]
  %v628 = vld [vmem:[%s3 + $0x88] sm:$0xff]
  %v629 = vld [vmem:[%s3 + $0x90] sm:$0xff]
  %v630 = vld [vmem:[%s3 + $0x98] sm:$0xff]
  %v631 = vld [vmem:[%s3 + $0xa0] sm:$0xff]
  %v632 = vld [vmem:[%s3 + $0xa8] sm:$0xff]
  %v633 = vld [vmem:[%s3 + $0xb0] sm:$0xff]
  %v634 = vld [vmem:[%s3 + $0xb8] sm:$0xff]
  %v635 = vld [vmem:[%s3 + $0xc0] sm:$0xff]
  %v636 = vld [vmem:[%s3 + $0xc8] sm:$0xff]
  %v663 = vunpack.c.l.b16 %v611
  %v664 = vunpack.c.h.b16 %v611
  %v665 = vunpack.c.l.b16 %v612
  %v666 = vunpack.c.h.b16 %v612
  %v667 = vunpack.c.l.b16 %v613
  %v668 = vunpack.c.h.b16 %v613
  %v669 = vunpack.c.l.b16 %v614
  %v670 = vunpack.c.h.b16 %v614
  %v671 = vunpack.c.l.b16 %v615
  %v672 = vunpack.c.h.b16 %v615
  %v673 = vunpack.c.l.b16 %v616
  %v674 = vunpack.c.h.b16 %v616
  %v675 = vunpack.c.l.b16 %v617
  %v676 = vunpack.c.h.b16 %v617
  %v677 = vunpack.c.l.b16 %v618
  %v678 = vunpack.c.h.b16 %v618
  %v679 = vunpack.c.l.b16 %v619
  %v680 = vunpack.c.h.b16 %v619
  %v681 = vunpack.c.l.b16 %v620
  %v682 = vunpack.c.h.b16 %v620
  %v683 = vunpack.c.l.b16 %v621
  %v684 = vunpack.c.h.b16 %v621
  %v685 = vunpack.c.l.b16 %v622
  %v686 = vunpack.c.h.b16 %v622
  %v687 = vunpack.c.l.b16 %v623
  %v688 = vunpack.c.h.b16 %v623
  %v689 = vunpack.c.l.b16 %v624
  %v690 = vunpack.c.h.b16 %v624
  %v691 = vunpack.c.l.b16 %v625
  %v692 = vunpack.c.h.b16 %v625
  %v693 = vunpack.c.l.b16 %v626
  %v694 = vunpack.c.h.b16 %v626
  %v695 = vunpack.c.l.b16 %v627
  %v696 = vunpack.c.h.b16 %v627
  %v697 = vunpack.c.l.b16 %v628
  %v698 = vunpack.c.h.b16 %v628
  %v699 = vunpack.c.l.b16 %v629
  %v700 = vunpack.c.h.b16 %v629
  %v701 = vunpack.c.l.b16 %v630
  %v702 = vunpack.c.h.b16 %v630
  %v703 = vunpack.c.l.b16 %v631
  %v704 = vunpack.c.h.b16 %v631
  %v705 = vunpack.c.l.b16 %v632
  %v706 = vunpack.c.h.b16 %v632
  %v707 = vunpack.c.l.b16 %v633
  %v708 = vunpack.c.h.b16 %v633
  %v709 = vunpack.c.l.b16 %v634
  %v710 = vunpack.c.h.b16 %v634
  %v711 = vunpack.c.l.b16 %v635
  %v712 = vunpack.c.h.b16 %v635
  %v713 = vunpack.c.l.b16 %v636
  %v714 = vunpack.c.h.b16 %v636
  %v715 = vpack.c.b16 %v667, %v663
  %v716 = vpack.c.b16 %v668, %v664
  %v717 = vpack.c.b16 %v669, %v665
  %v718 = vpack.c.b16 %v670, %v666
  %v719 = vpack.c.b16 %v675, %v671
  %v720 = vpack.c.b16 %v676, %v672
  %v721 = vpack.c.b16 %v677, %v673
  %v722 = vpack.c.b16 %v678, %v674
  %v723 = vpack.c.b16 %v683, %v679
  %v724 = vpack.c.b16 %v684, %v680
  %v725 = vpack.c.b16 %v685, %v681
  %v726 = vpack.c.b16 %v686, %v682
  %v727 = vpack.c.b16 %v691, %v687
  %v728 = vpack.c.b16 %v692, %v688
  %v729 = vpack.c.b16 %v693, %v689
  %v730 = vpack.c.b16 %v694, %v690
  %v731 = vpack.c.b16 %v699, %v695
  %v732 = vpack.c.b16 %v700, %v696
  %v733 = vpack.c.b16 %v701, %v697
  %v734 = vpack.c.b16 %v702, %v698
  %v735 = vpack.c.b16 %v707, %v703
  %v736 = vpack.c.b16 %v708, %v704
  %v737 = vpack.c.b16 %v709, %v705
  %v738 = vpack.c.b16 %v710, %v706
  %v739 = vpack.c.b16 %v711, %v711
  %v740 = vpack.c.b16 %v712, %v712
  %v741 = vpack.c.b16 %v713, %v713
  %v742 = vpack.c.b16 %v714, %v714
  %vm764 = vcmask 64512
  %v766 = vsel %vm764, %v718, 0
  %v769 = vsel %vm764, %v722, 0
  %v772 = vsel %vm764, %v726, 0
  %v775 = vsel %vm764, %v730, 0
  %v778 = vsel %vm764, %v734, 0
  %v781 = vsel %vm764, %v738, 0
  %v784 = vsel %vm764, %v742, 0
  %vm786 = vcmask 1043456
  %v788 = vsel %vm786, %v610, 0
  %790 = vmatprep.subr.bf16.mxu0 0
  %791 = vmatpush1.bf16.msra.mxu0 %v586
  %792 = vmatprep.subr.bf16.mxu0 0
  %793 = vmatpush1.bf16.msra.mxu0 %v587
  %794 = vmatprep.subr.bf16.mxu0 0
  %795 = vmatpush1.bf16.msra.mxu0 %v588
  %796 = vmatprep.subr.bf16.mxu0 0
  %797 = vmatpush1.bf16.msra.mxu0 %v589
  %798 = vmatprep.subr.bf16.mxu0 0
  %799 = vmatpush1.bf16.msra.mxu0 %v590
  %800 = vmatprep.subr.bf16.mxu0 0
  %801 = vmatpush1.bf16.msra.mxu0 %v591
  %802 = vmatprep.subr.bf16.mxu0 0
  %803 = vmatpush1.bf16.msra.mxu0 %v592
  %804 = vmatprep.subr.bf16.mxu0 0
  %805 = vmatpush1.bf16.msra.mxu0 %v593
  %806 = vmatprep.subr.bf16.mxu0 0
  %807 = vmatpush1.bf16.msra.mxu0 %v594
  %808 = vmatprep.subr.bf16.mxu0 0
  %809 = vmatpush1.bf16.msra.mxu0 %v595
  %810 = vmatprep.subr.bf16.mxu0 0
  %811 = vmatpush1.bf16.msra.mxu0 %v596
  %812 = vmatprep.subr.bf16.mxu0 0
  %813 = vmatpush1.bf16.msra.mxu0 %v597
  %814 = vmatprep.subr.bf16.mxu0 0
  %815 = vmatpush1.bf16.msra.mxu0 %v598
  %816 = vmatprep.subr.bf16.mxu0 0
  %817 = vmatpush1.bf16.msra.mxu0 %v599
  %818 = vmatprep.subr.bf16.mxu0 0
  %819 = vmatpush1.bf16.msra.mxu0 %v600
  %820 = vmatprep.subr.bf16.mxu0 0
  %821 = vmatpush1.bf16.msra.mxu0 %v601
  %822 = vmatprep.mubr.bf16.mxu0 %v716
  %823 = vmatmul.mubr.bf16.gmra.mrb[0].mxu0 %v715
  %v824 = vpop.f32.mrb[0].mxu0
  %v825 = vadd.f32 0.0, %v824
  %v826 = vpop.f32.mrb[0].mxu0
  %v827 = vpop.f32.mrb[0].mxu0
  %v828 = vadd.f32 0.0, %v827
  %v829 = vpop.f32.mrb[0].mxu0
  %830 = vmatprep.mubr.bf16.mxu0 %v720
  %831 = vmatmul.mubr.bf16.gmra.mrb[0].mxu0 %v719
  %v832 = vpop.f32.mrb[0].mxu0
  %v833 = vadd.f32 0.0, %v832
  %v834 = vpop.f32.mrb[0].mxu0
  %v835 = vpop.f32.mrb[0].mxu0
  %v836 = vadd.f32 0.0, %v835
  %v837 = vpop.f32.mrb[0].mxu0
  %838 = vmatprep.mubr.bf16.mxu0 %v724
  %839 = vmatmul.mubr.bf16.gmra.mrb[0].mxu0 %v723
  %v840 = vpop.f32.mrb[0].mxu0
  %v841 = vadd.f32 0.0, %v840
  %v842 = vpop.f32.mrb[0].mxu0
  %v843 = vpop.f32.mrb[0].mxu0
  %v844 = vadd.f32 0.0, %v843
  %v845 = vpop.f32.mrb[0].mxu0
  %846 = vmatprep.mubr.bf16.mxu0 %v728
  %847 = vmatmul.mubr.bf16.gmra.mrb[0].mxu0 %v727
  %v848 = vpop.f32.mrb[0].mxu0
  %v849 = vadd.f32 0.0, %v848
  %v850 = vpop.f32.mrb[0].mxu0
  %v851 = vpop.f32.mrb[0].mxu0
  %v852 = vadd.f32 0.0, %v851
  %v853 = vpop.f32.mrb[0].mxu0
  %854 = vmatprep.mubr.bf16.mxu0 %v732
  %855 = vmatmul.mubr.bf16.gmra.mrb[0].mxu0 %v731
  %v856 = vpop.f32.mrb[0].mxu0
  %v857 = vadd.f32 0.0, %v856
  %v858 = vpop.f32.mrb[0].mxu0
  %v859 = vpop.f32.mrb[0].mxu0
  %v860 = vadd.f32 0.0, %v859
  %v861 = vpop.f32.mrb[0].mxu0
  %862 = vmatprep.mubr.bf16.mxu0 %v736
  %863 = vmatmul.mubr.bf16.gmra.mrb[0].mxu0 %v735
  %v864 = vpop.f32.mrb[0].mxu0
  %v865 = vadd.f32 0.0, %v864
  %v866 = vpop.f32.mrb[0].mxu0
  %v867 = vpop.f32.mrb[0].mxu0
  %v868 = vadd.f32 0.0, %v867
  %v869 = vpop.f32.mrb[0].mxu0
  %870 = vmatprep.mubr.bf16.mxu0 %v740
  %871 = vmatmul.mubr.bf16.gmra.mrb[0].mxu0 %v739
  %v872 = vpop.f32.mrb[0].mxu0
  %v873 = vadd.f32 0.0, %v872
  %v874 = vpop.f32.mrb[0].mxu0
  %v875 = vpop.f32.mrb[0].mxu0
  %v876 = vpop.f32.mrb[0].mxu0
  %877 = vdwg.mxu0
  %878 = vmatprep.subr.bf16.mxu0 0
  %879 = vmatpush1.bf16.msra.mxu0 %v602
  %880 = vmatprep.subr.bf16.mxu0 0
  %881 = vmatpush1.bf16.msra.mxu0 %v603
  %882 = vmatprep.subr.bf16.mxu0 0
  %883 = vmatpush1.bf16.msra.mxu0 %v604
  %884 = vmatprep.subr.bf16.mxu0 0
  %885 = vmatpush1.bf16.msra.mxu0 %v605
  %886 = vmatprep.subr.bf16.mxu0 0
  %887 = vmatpush1.bf16.msra.mxu0 %v606
  %888 = vmatprep.subr.bf16.mxu0 0
  %889 = vmatpush1.bf16.msra.mxu0 %v607
  %890 = vmatprep.subr.bf16.mxu0 0
  %891 = vmatpush1.bf16.msra.mxu0 %v608
  %892 = vmatprep.subr.bf16.mxu0 0
  %893 = vmatpush1.bf16.msra.mxu0 %v609
  %894 = vmatprep.subr.bf16.mxu0 0
  %895 = vmatpush1.bf16.msra.mxu0 %v788
  %896 = vmatprep.subr.bf16.mxu0 0
  %897 = vmatpush1.bf16.msra.mxu0 0
  %898 = vmatprep.subr.bf16.mxu0 0
  %899 = vmatpush1.bf16.msra.mxu0 0
  %900 = vmatprep.subr.bf16.mxu0 0
  %901 = vmatpush1.bf16.msra.mxu0 0
  %902 = vmatprep.subr.bf16.mxu0 0
  %903 = vmatpush1.bf16.msra.mxu0 0
  %904 = vmatprep.subr.bf16.mxu0 0
  %905 = vmatpush1.bf16.msra.mxu0 0
  %906 = vmatprep.subr.bf16.mxu0 0
  %907 = vmatpush1.bf16.msra.mxu0 0
  %908 = vmatprep.subr.bf16.mxu0 0
  %909 = vmatpush1.bf16.msra.mxu0 0
  %910 = vmatprep.mubr.bf16.mxu0 %v766
  %911 = vmatmul.mubr.bf16.gmra.mrb[0].mxu0 %v717
  %v912 = vpop.f32.mrb[0].mxu0
  %v913 = vadd.f32 %v825, %v912
  %v914 = vpop.f32.mrb[0].mxu0
  %v915 = vpop.f32.mrb[0].mxu0
  %v916 = vadd.f32 %v828, %v915
  %v917 = vpop.f32.mrb[0].mxu0
  %918 = vmatprep.mubr.bf16.mxu0 %v769
  %919 = vmatmul.mubr.bf16.gmra.mrb[0].mxu0 %v721
  %v920 = vpop.f32.mrb[0].mxu0
  %v921 = vadd.f32 %v833, %v920
  %v922 = vpop.f32.mrb[0].mxu0
  %v923 = vpop.f32.mrb[0].mxu0
  %v924 = vadd.f32 %v836, %v923
  %v925 = vpop.f32.mrb[0].mxu0
  %926 = vmatprep.mubr.bf16.mxu0 %v772
  %927 = vmatmul.mubr.bf16.gmra.mrb[0].mxu0 %v725
  %v928 = vpop.f32.mrb[0].mxu0
  %v929 = vadd.f32 %v841, %v928
  %v930 = vpop.f32.mrb[0].mxu0
  %v931 = vpop.f32.mrb[0].mxu0
  %v932 = vadd.f32 %v844, %v931
  %v933 = vpop.f32.mrb[0].mxu0
  %934 = vmatprep.mubr.bf16.mxu0 %v775
  %935 = vmatmul.mubr.bf16.gmra.mrb[0].mxu0 %v729
  %v936 = vpop.f32.mrb[0].mxu0
  %v937 = vadd.f32 %v849, %v936
  %v938 = vpop.f32.mrb[0].mxu0
  %v939 = vpop.f32.mrb[0].mxu0
  %v940 = vadd.f32 %v852, %v939
  %v941 = vpop.f32.mrb[0].mxu0
  %942 = vmatprep.mubr.bf16.mxu0 %v778
  %943 = vmatmul.mubr.bf16.gmra.mrb[0].mxu0 %v733
  %v944 = vpop.f32.mrb[0].mxu0
  %v945 = vadd.f32 %v857, %v944
  %v946 = vpop.f32.mrb[0].mxu0
  %v947 = vpop.f32.mrb[0].mxu0
  %v948 = vadd.f32 %v860, %v947
  %v949 = vpop.f32.mrb[0].mxu0
  %950 = vmatprep.mubr.bf16.mxu0 %v781
  %951 = vmatmul.mubr.bf16.gmra.mrb[0].mxu0 %v737
  %v952 = vpop.f32.mrb[0].mxu0
  %v953 = vadd.f32 %v865, %v952
  %v954 = vpop.f32.mrb[0].mxu0
  %v955 = vpop.f32.mrb[0].mxu0
  %v956 = vadd.f32 %v868, %v955
  %v957 = vpop.f32.mrb[0].mxu0
  %958 = vmatprep.mubr.bf16.mxu0 %v784
  %959 = vmatmul.mubr.bf16.gmra.mrb[0].mxu0 %v741
  %v960 = vpop.f32.mrb[0].mxu0
  %v961 = vadd.f32 %v873, %v960
  %v962 = vpop.f32.mrb[0].mxu0
  %v963 = vpop.f32.mrb[0].mxu0
  %v964 = vpop.f32.mrb[0].mxu0
  %965 = vdwg.mxu0
  %v966 = vpack.c.bf16 %v916, %v913
  %v967 = vpack.c.bf16 %v924, %v921
  %v968 = vpack.c.bf16 %v932, %v929
  %v969 = vpack.c.bf16 %v940, %v937
  %v970 = vpack.c.bf16 %v948, %v945
  %v971 = vpack.c.bf16 %v956, %v953
  %v972 = vpack.c.bf16 %v961, %v961
  %v973 = vld [vmem:[%s4] sm:$0xf]
  %v974 = vld [vmem:[%s4 + $0x4] sm:$0xf]
  %v975 = vld [vmem:[%s4 + $0x8] sm:$0xf]
  %v976 = vld [vmem:[%s4 + $0xc] sm:$0xf]
  %v977 = vld [vmem:[%s4 + $0x10] sm:$0xf]
  %v978 = vld [vmem:[%s4 + $0x14] sm:$0xf]
  %v979 = vld [vmem:[%s4 + $0x18] sm:$0xf]
  %v980 = vld [vmem:[%s4 + $0x1c] sm:$0xf]
  %v981 = vld [vmem:[%s4 + $0x20] sm:$0xf]
  %v982 = vld [vmem:[%s4 + $0x24] sm:$0xf]
  %v983 = vld [vmem:[%s4 + $0x28] sm:$0xf]
  %v984 = vld [vmem:[%s4 + $0x2c] sm:$0xf]
  %v985 = vld [vmem:[%s4 + $0x30] sm:$0xf]
  %v986 = vld [vmem:[%s4 + $0x34] sm:$0xf]
  %v987 = vld [vmem:[%s4 + $0x38] sm:$0xf]
  %v988 = vld [vmem:[%s4 + $0x3c] sm:$0xf]
  %s989 = scalar_lea.vmem %s3, 208
  %v990 = vld [vmem:[%s989] sm:$0xff]
  %v991 = vld [vmem:[%s989 + $0x8] sm:$0xff]
  %v992 = vld [vmem:[%s989 + $0x10] sm:$0xff]
  %v993 = vld [vmem:[%s989 + $0x18] sm:$0xff]
  %v994 = vld [vmem:[%s989 + $0x20] sm:$0xff]
  %v995 = vld [vmem:[%s989 + $0x28] sm:$0xff]
  %v996 = vld [vmem:[%s989 + $0x30] sm:$0xff]
  %v997 = vld [vmem:[%s989 + $0x38] sm:$0xff]
  %v998 = vld [vmem:[%s989 + $0x40] sm:$0xff]
  %v999 = vld [vmem:[%s989 + $0x48] sm:$0xff]
  %v1000 = vld [vmem:[%s989 + $0x50] sm:$0xff]
  %v1001 = vld [vmem:[%s989 + $0x58] sm:$0xff]
  %v1002 = vld [vmem:[%s989 + $0x60] sm:$0xff]
  %v1003 = vld [vmem:[%s989 + $0x68] sm:$0xff]
  %v1004 = vld [vmem:[%s989 + $0x70] sm:$0xff]
  %v1005 = vld [vmem:[%s989 + $0x78] sm:$0xff]
  %v1006 = vld [vmem:[%s989 + $0x80] sm:$0xff]
  %v1007 = vld [vmem:[%s989 + $0x88] sm:$0xff]
  %v1008 = vld [vmem:[%s989 + $0x90] sm:$0xff]
  %v1009 = vld [vmem:[%s989 + $0x98] sm:$0xff]
  %v1010 = vld [vmem:[%s989 + $0xa0] sm:$0xff]
  %v1011 = vld [vmem:[%s989 + $0xa8] sm:$0xff]
  %v1012 = vld [vmem:[%s989 + $0xb0] sm:$0xff]
  %v1013 = vld [vmem:[%s989 + $0xb8] sm:$0xff]
  %v1014 = vld [vmem:[%s989 + $0xc0] sm:$0xff]
  %v1015 = vld [vmem:[%s989 + $0xc8] sm:$0xff]
  %v1042 = vunpack.c.l.b16 %v990
  %v1043 = vunpack.c.h.b16 %v990
  %v1044 = vunpack.c.l.b16 %v991
  %v1045 = vunpack.c.h.b16 %v991
  %v1046 = vunpack.c.l.b16 %v992
  %v1047 = vunpack.c.h.b16 %v992
  %v1048 = vunpack.c.l.b16 %v993
  %v1049 = vunpack.c.h.b16 %v993
  %v1050 = vunpack.c.l.b16 %v994
  %v1051 = vunpack.c.h.b16 %v994
  %v1052 = vunpack.c.l.b16 %v995
  %v1053 = vunpack.c.h.b16 %v995
  %v1054 = vunpack.c.l.b16 %v996
  %v1055 = vunpack.c.h.b16 %v996
  %v1056 = vunpack.c.l.b16 %v997
  %v1057 = vunpack.c.h.b16 %v997
  %v1058 = vunpack.c.l.b16 %v998
  %v1059 = vunpack.c.h.b16 %v998
  %v1060 = vunpack.c.l.b16 %v999
  %v1061 = vunpack.c.h.b16 %v999
  %v1062 = vunpack.c.l.b16 %v1000
  %v1063 = vunpack.c.h.b16 %v1000
  %v1064 = vunpack.c.l.b16 %v1001
  %v1065 = vunpack.c.h.b16 %v1001
  %v1066 = vunpack.c.l.b16 %v1002
  %v1067 = vunpack.c.h.b16 %v1002
  %v1068 = vunpack.c.l.b16 %v1003
  %v1069 = vunpack.c.h.b16 %v1003
  %v1070 = vunpack.c.l.b16 %v1004
  %v1071 = vunpack.c.h.b16 %v1004
  %v1072 = vunpack.c.l.b16 %v1005
  %v1073 = vunpack.c.h.b16 %v1005
  %v1074 = vunpack.c.l.b16 %v1006
  %v1075 = vunpack.c.h.b16 %v1006
  %v1076 = vunpack.c.l.b16 %v1007
  %v1077 = vunpack.c.h.b16 %v1007
  %v1078 = vunpack.c.l.b16 %v1008
  %v1079 = vunpack.c.h.b16 %v1008
  %v1080 = vunpack.c.l.b16 %v1009
  %v1081 = vunpack.c.h.b16 %v1009
  %v1082 = vunpack.c.l.b16 %v1010
  %v1083 = vunpack.c.h.b16 %v1010
  %v1084 = vunpack.c.l.b16 %v1011
  %v1085 = vunpack.c.h.b16 %v1011
  %v1086 = vunpack.c.l.b16 %v1012
  %v1087 = vunpack.c.h.b16 %v1012
  %v1088 = vunpack.c.l.b16 %v1013
  %v1089 = vunpack.c.h.b16 %v1013
  %v1090 = vunpack.c.l.b16 %v1014
  %v1091 = vunpack.c.h.b16 %v1014
  %v1092 = vunpack.c.l.b16 %v1015
  %v1093 = vunpack.c.h.b16 %v1015
  %v1094 = vpack.c.b16 %v1046, %v1042
  %v1095 = vpack.c.b16 %v1047, %v1043
  %v1096 = vpack.c.b16 %v1048, %v1044
  %v1097 = vpack.c.b16 %v1049, %v1045
  %v1098 = vpack.c.b16 %v1054, %v1050
  %v1099 = vpack.c.b16 %v1055, %v1051
  %v1100 = vpack.c.b16 %v1056, %v1052
  %v1101 = vpack.c.b16 %v1057, %v1053
  %v1102 = vpack.c.b16 %v1062, %v1058
  %v1103 = vpack.c.b16 %v1063, %v1059
  %v1104 = vpack.c.b16 %v1064, %v1060
  %v1105 = vpack.c.b16 %v1065, %v1061
  %v1106 = vpack.c.b16 %v1070, %v1066
  %v1107 = vpack.c.b16 %v1071, %v1067
  %v1108 = vpack.c.b16 %v1072, %v1068
  %v1109 = vpack.c.b16 %v1073, %v1069
  %v1110 = vpack.c.b16 %v1078, %v1074
  %v1111 = vpack.c.b16 %v1079, %v1075
  %v1112 = vpack.c.b16 %v1080, %v1076
  %v1113 = vpack.c.b16 %v1081, %v1077
  %v1114 = vpack.c.b16 %v1086, %v1082
  %v1115 = vpack.c.b16 %v1087, %v1083
  %v1116 = vpack.c.b16 %v1088, %v1084
  %v1117 = vpack.c.b16 %v1089, %v1085
  %v1118 = vpack.c.b16 %v1090, %v1090
  %v1119 = vpack.c.b16 %v1091, %v1091
  %v1120 = vpack.c.b16 %v1092, %v1092
  %v1121 = vpack.c.b16 %v1093, %v1093
  %v1144 = vsel %vm764, %v1097, 0
  %v1147 = vsel %vm764, %v1101, 0
  %v1150 = vsel %vm764, %v1105, 0
  %v1153 = vsel %vm764, %v1109, 0
  %v1156 = vsel %vm764, %v1113, 0
  %v1159 = vsel %vm764, %v1117, 0
  %v1162 = vsel %vm764, %v1121, 0
  %1164 = vmatprep.subr.bf16.mxu0 0
  %1165 = vmatpush1.bf16.msra.mxu0 %v586
  %1166 = vmatprep.subr.bf16.mxu0 0
  %1167 = vmatpush1.bf16.msra.mxu0 %v587
  %1168 = vmatprep.subr.bf16.mxu0 0
  %1169 = vmatpush1.bf16.msra.mxu0 %v588
  %1170 = vmatprep.subr.bf16.mxu0 0
  %1171 = vmatpush1.bf16.msra.mxu0 %v589
  %1172 = vmatprep.subr.bf16.mxu0 0
  %1173 = vmatpush1.bf16.msra.mxu0 %v590
  %1174 = vmatprep.subr.bf16.mxu0 0
  %1175 = vmatpush1.bf16.msra.mxu0 %v591
  %1176 = vmatprep.subr.bf16.mxu0 0
  %1177 = vmatpush1.bf16.msra.mxu0 %v592
  %1178 = vmatprep.subr.bf16.mxu0 0
  %1179 = vmatpush1.bf16.msra.mxu0 %v593
  %1180 = vmatprep.subr.bf16.mxu0 0
  %1181 = vmatpush1.bf16.msra.mxu0 %v594
  %1182 = vmatprep.subr.bf16.mxu0 0
  %1183 = vmatpush1.bf16.msra.mxu0 %v595
  %1184 = vmatprep.subr.bf16.mxu0 0
  %1185 = vmatpush1.bf16.msra.mxu0 %v596
  %1186 = vmatprep.subr.bf16.mxu0 0
  %1187 = vmatpush1.bf16.msra.mxu0 %v597
  %1188 = vmatprep.subr.bf16.mxu0 0
  %1189 = vmatpush1.bf16.msra.mxu0 %v598
  %1190 = vmatprep.subr.bf16.mxu0 0
  %1191 = vmatpush1.bf16.msra.mxu0 %v599
  %1192 = vmatprep.subr.bf16.mxu0 0
  %1193 = vmatpush1.bf16.msra.mxu0 %v600
  %1194 = vmatprep.subr.bf16.mxu0 0
  %1195 = vmatpush1.bf16.msra.mxu0 %v601
  %1196 = vmatprep.mubr.bf16.mxu0 %v1095
  %1197 = vmatmul.mubr.bf16.gmra.mrb[0].mxu0 %v1094
  %v1198 = vpop.f32.mrb[0].mxu0
  %v1199 = vadd.f32 0.0, %v1198
  %v1200 = vpop.f32.mrb[0].mxu0
  %v1201 = vpop.f32.mrb[0].mxu0
  %v1202 = vadd.f32 0.0, %v1201
  %v1203 = vpop.f32.mrb[0].mxu0
  %1204 = vmatprep.mubr.bf16.mxu0 %v1099
  %1205 = vmatmul.mubr.bf16.gmra.mrb[0].mxu0 %v1098
  %v1206 = vpop.f32.mrb[0].mxu0
  %v1207 = vadd.f32 0.0, %v1206
  %v1208 = vpop.f32.mrb[0].mxu0
  %v1209 = vpop.f32.mrb[0].mxu0
  %v1210 = vadd.f32 0.0, %v1209
  %v1211 = vpop.f32.mrb[0].mxu0
  %1212 = vmatprep.mubr.bf16.mxu0 %v1103
  %1213 = vmatmul.mubr.bf16.gmra.mrb[0].mxu0 %v1102
  %v1214 = vpop.f32.mrb[0].mxu0
  %v1215 = vadd.f32 0.0, %v1214
  %v1216 = vpop.f32.mrb[0].mxu0
  %v1217 = vpop.f32.mrb[0].mxu0
  %v1218 = vadd.f32 0.0, %v1217
  %v1219 = vpop.f32.mrb[0].mxu0
  %1220 = vmatprep.mubr.bf16.mxu0 %v1107
  %1221 = vmatmul.mubr.bf16.gmra.mrb[0].mxu0 %v1106
  %v1222 = vpop.f32.mrb[0].mxu0
  %v1223 = vadd.f32 0.0, %v1222
  %v1224 = vpop.f32.mrb[0].mxu0
  %v1225 = vpop.f32.mrb[0].mxu0
  %v1226 = vadd.f32 0.0, %v1225
  %v1227 = vpop.f32.mrb[0].mxu0
  %1228 = vmatprep.mubr.bf16.mxu0 %v1111
  %1229 = vmatmul.mubr.bf16.gmra.mrb[0].mxu0 %v1110
  %v1230 = vpop.f32.mrb[0].mxu0
  %v1231 = vadd.f32 0.0, %v1230
  %v1232 = vpop.f32.mrb[0].mxu0
  %v1233 = vpop.f32.mrb[0].mxu0
  %v1234 = vadd.f32 0.0, %v1233
  %v1235 = vpop.f32.mrb[0].mxu0
  %1236 = vmatprep.mubr.bf16.mxu0 %v1115
  %1237 = vmatmul.mubr.bf16.gmra.mrb[0].mxu0 %v1114
  %v1238 = vpop.f32.mrb[0].mxu0
  %v1239 = vadd.f32 0.0, %v1238
  %v1240 = vpop.f32.mrb[0].mxu0
  %v1241 = vpop.f32.mrb[0].mxu0
  %v1242 = vadd.f32 0.0, %v1241
  %v1243 = vpop.f32.mrb[0].mxu0
  %1244 = vmatprep.mubr.bf16.mxu0 %v1119
  %1245 = vmatmul.mubr.bf16.gmra.mrb[0].mxu0 %v1118
  %v1246 = vpop.f32.mrb[0].mxu0
  %v1247 = vadd.f32 0.0, %v1246
  %v1248 = vpop.f32.mrb[0].mxu0
  %v1249 = vpop.f32.mrb[0].mxu0
  %v1250 = vpop.f32.mrb[0].mxu0
  %1251 = vdwg.mxu0
  %1252 = vmatprep.subr.bf16.mxu0 0
  %1253 = vmatpush1.bf16.msra.mxu0 %v602
  %1254 = vmatprep.subr.bf16.mxu0 0
  %1255 = vmatpush1.bf16.msra.mxu0 %v603
  %1256 = vmatprep.subr.bf16.mxu0 0
  %1257 = vmatpush1.bf16.msra.mxu0 %v604
  %1258 = vmatprep.subr.bf16.mxu0 0
  %1259 = vmatpush1.bf16.msra.mxu0 %v605
  %1260 = vmatprep.subr.bf16.mxu0 0
  %1261 = vmatpush1.bf16.msra.mxu0 %v606
  %1262 = vmatprep.subr.bf16.mxu0 0
  %1263 = vmatpush1.bf16.msra.mxu0 %v607
  %1264 = vmatprep.subr.bf16.mxu0 0
  %1265 = vmatpush1.bf16.msra.mxu0 %v608
  %1266 = vmatprep.subr.bf16.mxu0 0
  %1267 = vmatpush1.bf16.msra.mxu0 %v609
  %1268 = vmatprep.subr.bf16.mxu0 0
  %1269 = vmatpush1.bf16.msra.mxu0 %v788
  %1270 = vmatprep.subr.bf16.mxu0 0
  %1271 = vmatpush1.bf16.msra.mxu0 0
  %1272 = vmatprep.subr.bf16.mxu0 0
  %1273 = vmatpush1.bf16.msra.mxu0 0
  %1274 = vmatprep.subr.bf16.mxu0 0
  %1275 = vmatpush1.bf16.msra.mxu0 0
  %1276 = vmatprep.subr.bf16.mxu0 0
  %1277 = vmatpush1.bf16.msra.mxu0 0
  %1278 = vmatprep.subr.bf16.mxu0 0
  %1279 = vmatpush1.bf16.msra.mxu0 0
  %1280 = vmatprep.subr.bf16.mxu0 0
  %1281 = vmatpush1.bf16.msra.mxu0 0
  %1282 = vmatprep.subr.bf16.mxu0 0
  %1283 = vmatpush1.bf16.msra.mxu0 0
  %1284 = vmatprep.mubr.bf16.mxu0 %v1144
  %1285 = vmatmul.mubr.bf16.gmra.mrb[0].mxu0 %v1096
  %v1286 = vpop.f32.mrb[0].mxu0
  %v1287 = vadd.f32 %v1199, %v1286
  %v1288 = vpop.f32.mrb[0].mxu0
  %v1289 = vpop.f32.mrb[0].mxu0
  %v1290 = vadd.f32 %v1202, %v1289
  %v1291 = vpop.f32.mrb[0].mxu0
  %1292 = vmatprep.mubr.bf16.mxu0 %v1147
  %1293 = vmatmul.mubr.bf16.gmra.mrb[0].mxu0 %v1100
  %v1294 = vpop.f32.mrb[0].mxu0
  %v1295 = vadd.f32 %v1207, %v1294
  %v1296 = vpop.f32.mrb[0].mxu0
  %v1297 = vpop.f32.mrb[0].mxu0
  %v1298 = vadd.f32 %v1210, %v1297
  %v1299 = vpop.f32.mrb[0].mxu0
  %1300 = vmatprep.mubr.bf16.mxu0 %v1150
  %1301 = vmatmul.mubr.bf16.gmra.mrb[0].mxu0 %v1104
  %v1302 = vpop.f32.mrb[0].mxu0
  %v1303 = vadd.f32 %v1215, %v1302
  %v1304 = vpop.f32.mrb[0].mxu0
  %v1305 = vpop.f32.mrb[0].mxu0
  %v1306 = vadd.f32 %v1218, %v1305
  %v1307 = vpop.f32.mrb[0].mxu0
  %1308 = vmatprep.mubr.bf16.mxu0 %v1153
  %1309 = vmatmul.mubr.bf16.gmra.mrb[0].mxu0 %v1108
  %v1310 = vpop.f32.mrb[0].mxu0
  %v1311 = vadd.f32 %v1223, %v1310
  %v1312 = vpop.f32.mrb[0].mxu0
  %v1313 = vpop.f32.mrb[0].mxu0
  %v1314 = vadd.f32 %v1226, %v1313
  %v1315 = vpop.f32.mrb[0].mxu0
  %1316 = vmatprep.mubr.bf16.mxu0 %v1156
  %1317 = vmatmul.mubr.bf16.gmra.mrb[0].mxu0 %v1112
  %v1318 = vpop.f32.mrb[0].mxu0
  %v1319 = vadd.f32 %v1231, %v1318
  %v1320 = vpop.f32.mrb[0].mxu0
  %v1321 = vpop.f32.mrb[0].mxu0
  %v1322 = vadd.f32 %v1234, %v1321
  %v1323 = vpop.f32.mrb[0].mxu0
  %1324 = vmatprep.mubr.bf16.mxu0 %v1159
  %1325 = vmatmul.mubr.bf16.gmra.mrb[0].mxu0 %v1116
  %v1326 = vpop.f32.mrb[0].mxu0
  %v1327 = vadd.f32 %v1239, %v1326
  %v1328 = vpop.f32.mrb[0].mxu0
  %v1329 = vpop.f32.mrb[0].mxu0
  %v1330 = vadd.f32 %v1242, %v1329
  %v1331 = vpop.f32.mrb[0].mxu0
  %1332 = vmatprep.mubr.bf16.mxu0 %v1162
  %1333 = vmatmul.mubr.bf16.gmra.mrb[0].mxu0 %v1120
  %v1334 = vpop.f32.mrb[0].mxu0
  %v1335 = vadd.f32 %v1247, %v1334
  %v1336 = vpop.f32.mrb[0].mxu0
  %v1337 = vpop.f32.mrb[0].mxu0
  %v1338 = vpop.f32.mrb[0].mxu0
  %1339 = vdwg.mxu0
  %v1340 = vpack.c.bf16 %v1290, %v1287
  %v1341 = vpack.c.bf16 %v1298, %v1295
  %v1342 = vpack.c.bf16 %v1306, %v1303
  %v1343 = vpack.c.bf16 %v1314, %v1311
  %v1344 = vpack.c.bf16 %v1322, %v1319
  %v1345 = vpack.c.bf16 %v1330, %v1327
  %v1346 = vpack.c.bf16 %v1335, %v1335
  %s1347 = scalar_lea.vmem %s4, 64
  %v1348 = vld [vmem:[%s1347] sm:$0xf]
  %v1349 = vld [vmem:[%s1347 + $0x4] sm:$0xf]
  %v1350 = vld [vmem:[%s1347 + $0x8] sm:$0xf]
  %v1351 = vld [vmem:[%s1347 + $0xc] sm:$0xf]
  %v1352 = vld [vmem:[%s1347 + $0x10] sm:$0xf]
  %v1353 = vld [vmem:[%s1347 + $0x14] sm:$0xf]
  %v1354 = vld [vmem:[%s1347 + $0x18] sm:$0xf]
  %v1355 = vld [vmem:[%s1347 + $0x1c] sm:$0xf]
  %v1356 = vld [vmem:[%s1347 + $0x20] sm:$0xf]
  %v1357 = vld [vmem:[%s1347 + $0x24] sm:$0xf]
  %v1358 = vld [vmem:[%s1347 + $0x28] sm:$0xf]
  %v1359 = vld [vmem:[%s1347 + $0x2c] sm:$0xf]
  %v1360 = vld [vmem:[%s1347 + $0x30] sm:$0xf]
  %v1361 = vld [vmem:[%s1347 + $0x34] sm:$0xf]
  %v1362 = vld [vmem:[%s1347 + $0x38] sm:$0xf]
  %v1363 = vld [vmem:[%s1347 + $0x3c] sm:$0xf]
  %v1380 = vunpack.c.l.b16 %v1348
  %v1381 = vunpack.c.l.b16 %v1349
  %v1382 = vunpack.c.l.b16 %v1350
  %v1383 = vunpack.c.l.b16 %v1351
  %v1384 = vunpack.c.l.b16 %v1352
  %v1385 = vunpack.c.l.b16 %v1353
  %v1386 = vunpack.c.l.b16 %v1354
  %v1387 = vunpack.c.l.b16 %v1355
  %v1388 = vunpack.c.l.b16 %v1356
  %v1389 = vunpack.c.l.b16 %v1357
  %v1390 = vunpack.c.l.b16 %v1358
  %v1391 = vunpack.c.l.b16 %v1359
  %v1392 = vunpack.c.l.b16 %v1360
  %v1393 = vunpack.c.l.b16 %v1361
  %v1394 = vunpack.c.l.b16 %v1362
  %v1395 = vunpack.c.l.b16 %v1363
  %v1396 = vpack.c.b16 %v1381, %v1380
  %v1397 = vpack.c.b16 %v1383, %v1382
  %v1398 = vpack.c.b16 %v1385, %v1384
  %v1399 = vpack.c.b16 %v1387, %v1386
  %v1400 = vpack.c.b16 %v1389, %v1388
  %v1401 = vpack.c.b16 %v1391, %v1390
  %v1402 = vpack.c.b16 %v1393, %v1392
  %v1403 = vpack.c.b16 %v1395, %v1394
  %1412 = vmatprep.subr.bf16.mxu0 0
  %1413 = vmatpush1.bf16.msra.mxu0 %v1396
  %1414 = vmatprep.subr.bf16.mxu0 0
  %1415 = vmatpush1.bf16.msra.mxu0 %v1397
  %1416 = vmatprep.subr.bf16.mxu0 0
  %1417 = vmatpush1.bf16.msra.mxu0 %v1398
  %1418 = vmatprep.subr.bf16.mxu0 0
  %1419 = vmatpush1.bf16.msra.mxu0 %v1399
  %1420 = vmatprep.subr.bf16.mxu0 0
  %1421 = vmatpush1.bf16.msra.mxu0 %v1400
  %1422 = vmatprep.subr.bf16.mxu0 0
  %1423 = vmatpush1.bf16.msra.mxu0 %v1401
  %1424 = vmatprep.subr.bf16.mxu0 0
  %1425 = vmatpush1.bf16.msra.mxu0 %v1402
  %1426 = vmatprep.subr.bf16.mxu0 0
  %1427 = vmatpush1.bf16.msra.mxu0 %v1403
  %1428 = vmatprep.subr.bf16.mxu0 0
  %1429 = vmatpush1.bf16.msra.mxu0 0
  %1430 = vmatprep.subr.bf16.mxu0 0
  %1431 = vmatpush1.bf16.msra.mxu0 0
  %1432 = vmatprep.subr.bf16.mxu0 0
  %1433 = vmatpush1.bf16.msra.mxu0 0
  %1434 = vmatprep.subr.bf16.mxu0 0
  %1435 = vmatpush1.bf16.msra.mxu0 0
  %1436 = vmatprep.subr.bf16.mxu0 0
  %1437 = vmatpush1.bf16.msra.mxu0 0
  %1438 = vmatprep.subr.bf16.mxu0 0
  %1439 = vmatpush1.bf16.msra.mxu0 0
  %1440 = vmatprep.subr.bf16.mxu0 0
  %1441 = vmatpush1.bf16.msra.mxu0 0
  %1442 = vmatprep.subr.bf16.mxu0 0
  %1443 = vmatpush1.bf16.msra.mxu0 0
  %1444 = vmatprep.mubr.bf16.mxu0 0
  %1445 = vmatmul.mubr.bf16.gmra.mrb[0].mxu0 %v1340
  %v1446 = vpop.f32.mrb[0].mxu0
  %v1447 = vadd.f32 0.0, %v1446
  %v1448 = vpop.f32.mrb[0].mxu0
  %v1449 = vpop.f32.mrb[0].mxu0
  %v1450 = vadd.f32 0.0, %v1449
  %v1451 = vpop.f32.mrb[0].mxu0
  %1452 = vmatprep.mubr.bf16.mxu0 0
  %1453 = vmatmul.mubr.bf16.gmra.mrb[0].mxu0 %v1341
  %v1454 = vpop.f32.mrb[0].mxu0
  %v1455 = vadd.f32 0.0, %v1454
  %v1456 = vpop.f32.mrb[0].mxu0
  %v1457 = vpop.f32.mrb[0].mxu0
  %v1458 = vadd.f32 0.0, %v1457
  %v1459 = vpop.f32.mrb[0].mxu0
  %1460 = vmatprep.mubr.bf16.mxu0 0
  %1461 = vmatmul.mubr.bf16.gmra.mrb[0].mxu0 %v1342
  %v1462 = vpop.f32.mrb[0].mxu0
  %v1463 = vadd.f32 0.0, %v1462
  %v1464 = vpop.f32.mrb[0].mxu0
  %v1465 = vpop.f32.mrb[0].mxu0
  %v1466 = vadd.f32 0.0, %v1465
  %v1467 = vpop.f32.mrb[0].mxu0
  %1468 = vmatprep.mubr.bf16.mxu0 0
  %1469 = vmatmul.mubr.bf16.gmra.mrb[0].mxu0 %v1343
  %v1470 = vpop.f32.mrb[0].mxu0
  %v1471 = vadd.f32 0.0, %v1470
  %v1472 = vpop.f32.mrb[0].mxu0
  %v1473 = vpop.f32.mrb[0].mxu0
  %v1474 = vadd.f32 0.0, %v1473
  %v1475 = vpop.f32.mrb[0].mxu0
  %1476 = vmatprep.mubr.bf16.mxu0 0
  %1477 = vmatmul.mubr.bf16.gmra.mrb[0].mxu0 %v1344
  %v1478 = vpop.f32.mrb[0].mxu0
  %v1479 = vadd.f32 0.0, %v1478
  %v1480 = vpop.f32.mrb[0].mxu0
  %v1481 = vpop.f32.mrb[0].mxu0
  %v1482 = vadd.f32 0.0, %v1481
  %v1483 = vpop.f32.mrb[0].mxu0
  %1484 = vmatprep.mubr.bf16.mxu0 0
  %1485 = vmatmul.mubr.bf16.gmra.mrb[0].mxu0 %v1345
  %v1486 = vpop.f32.mrb[0].mxu0
  %v1487 = vadd.f32 0.0, %v1486
  %v1488 = vpop.f32.mrb[0].mxu0
  %v1489 = vpop.f32.mrb[0].mxu0
  %v1490 = vadd.f32 0.0, %v1489
  %v1491 = vpop.f32.mrb[0].mxu0
  %1492 = vmatprep.mubr.bf16.mxu0 0
  %1493 = vmatmul.mubr.bf16.gmra.mrb[0].mxu0 %v1346
  %v1494 = vpop.f32.mrb[0].mxu0
  %v1495 = vadd.f32 0.0, %v1494
  %v1496 = vpop.f32.mrb[0].mxu0
  %v1497 = vpop.f32.mrb[0].mxu0
  %v1498 = vpop.f32.mrb[0].mxu0
  %1499 = vdwg.mxu0
  %v1516 = vunpack.c.l.b16 %v973
  %v1517 = vunpack.c.l.b16 %v974
  %v1518 = vunpack.c.l.b16 %v975
  %v1519 = vunpack.c.l.b16 %v976
  %v1520 = vunpack.c.l.b16 %v977
  %v1521 = vunpack.c.l.b16 %v978
  %v1522 = vunpack.c.l.b16 %v979
  %v1523 = vunpack.c.l.b16 %v980
  %v1524 = vunpack.c.l.b16 %v981
  %v1525 = vunpack.c.l.b16 %v982
  %v1526 = vunpack.c.l.b16 %v983
  %v1527 = vunpack.c.l.b16 %v984
  %v1528 = vunpack.c.l.b16 %v985
  %v1529 = vunpack.c.l.b16 %v986
  %v1530 = vunpack.c.l.b16 %v987
  %v1531 = vunpack.c.l.b16 %v988
  %v1532 = vpack.c.b16 %v1517, %v1516
  %v1533 = vpack.c.b16 %v1519, %v1518
  %v1534 = vpack.c.b16 %v1521, %v1520
  %v1535 = vpack.c.b16 %v1523, %v1522
  %v1536 = vpack.c.b16 %v1525, %v1524
  %v1537 = vpack.c.b16 %v1527, %v1526
  %v1538 = vpack.c.b16 %v1529, %v1528
  %v1539 = vpack.c.b16 %v1531, %v1530
  %1548 = vmatprep.subr.bf16.mxu0 0
  %1549 = vmatpush1.bf16.msra.mxu0 %v1532
  %1550 = vmatprep.subr.bf16.mxu0 0
  %1551 = vmatpush1.bf16.msra.mxu0 %v1533
  %1552 = vmatprep.subr.bf16.mxu0 0
  %1553 = vmatpush1.bf16.msra.mxu0 %v1534
  %1554 = vmatprep.subr.bf16.mxu0 0
  %1555 = vmatpush1.bf16.msra.mxu0 %v1535
  %1556 = vmatprep.subr.bf16.mxu0 0
  %1557 = vmatpush1.bf16.msra.mxu0 %v1536
  %1558 = vmatprep.subr.bf16.mxu0 0
  %1559 = vmatpush1.bf16.msra.mxu0 %v1537
  %1560 = vmatprep.subr.bf16.mxu0 0
  %1561 = vmatpush1.bf16.msra.mxu0 %v1538
  %1562 = vmatprep.subr.bf16.mxu0 0
  %1563 = vmatpush1.bf16.msra.mxu0 %v1539
  %1564 = vmatprep.subr.bf16.mxu0 0
  %1565 = vmatpush1.bf16.msra.mxu0 0
  %1566 = vmatprep.subr.bf16.mxu0 0
  %1567 = vmatpush1.bf16.msra.mxu0 0
  %1568 = vmatprep.subr.bf16.mxu0 0
  %1569 = vmatpush1.bf16.msra.mxu0 0
  %1570 = vmatprep.subr.bf16.mxu0 0
  %1571 = vmatpush1.bf16.msra.mxu0 0
  %1572 = vmatprep.subr.bf16.mxu0 0
  %1573 = vmatpush1.bf16.msra.mxu0 0
  %1574 = vmatprep.subr.bf16.mxu0 0
  %1575 = vmatpush1.bf16.msra.mxu0 0
  %1576 = vmatprep.subr.bf16.mxu0 0
  %1577 = vmatpush1.bf16.msra.mxu0 0
  %1578 = vmatprep.subr.bf16.mxu0 0
  %1579 = vmatpush1.bf16.msra.mxu0 0
  %1580 = vmatprep.mubr.bf16.mxu0 0
  %1581 = vmatmul.mubr.bf16.gmra.mrb[0].mxu0 %v966
  %v1582 = vpop.f32.mrb[0].mxu0
  %v1583 = vadd.f32 %v1447, %v1582
  %v1584 = vpop.f32.mrb[0].mxu0
  %v1585 = vpop.f32.mrb[0].mxu0
  %v1586 = vadd.f32 %v1450, %v1585
  %v1587 = vpop.f32.mrb[0].mxu0
  %1588 = vmatprep.mubr.bf16.mxu0 0
  %1589 = vmatmul.mubr.bf16.gmra.mrb[0].mxu0 %v967
  %v1590 = vpop.f32.mrb[0].mxu0
  %v1591 = vadd.f32 %v1455, %v1590
  %v1592 = vpop.f32.mrb[0].mxu0
  %v1593 = vpop.f32.mrb[0].mxu0
  %v1594 = vadd.f32 %v1458, %v1593
  %v1595 = vpop.f32.mrb[0].mxu0
  %1596 = vmatprep.mubr.bf16.mxu0 0
  %1597 = vmatmul.mubr.bf16.gmra.mrb[0].mxu0 %v968
  %v1598 = vpop.f32.mrb[0].mxu0
  %v1599 = vadd.f32 %v1463, %v1598
  %v1600 = vpop.f32.mrb[0].mxu0
  %v1601 = vpop.f32.mrb[0].mxu0
  %v1602 = vadd.f32 %v1466, %v1601
  %v1603 = vpop.f32.mrb[0].mxu0
  %1604 = vmatprep.mubr.bf16.mxu0 0
  %1605 = vmatmul.mubr.bf16.gmra.mrb[0].mxu0 %v969
  %v1606 = vpop.f32.mrb[0].mxu0
  %v1607 = vadd.f32 %v1471, %v1606
  %v1608 = vpop.f32.mrb[0].mxu0
  %v1609 = vpop.f32.mrb[0].mxu0
  %v1610 = vadd.f32 %v1474, %v1609
  %v1611 = vpop.f32.mrb[0].mxu0
  %1612 = vmatprep.mubr.bf16.mxu0 0
  %1613 = vmatmul.mubr.bf16.gmra.mrb[0].mxu0 %v970
  %v1614 = vpop.f32.mrb[0].mxu0
  %v1615 = vadd.f32 %v1479, %v1614
  %v1616 = vpop.f32.mrb[0].mxu0
  %v1617 = vpop.f32.mrb[0].mxu0
  %v1618 = vadd.f32 %v1482, %v1617
  %v1619 = vpop.f32.mrb[0].mxu0
  %1620 = vmatprep.mubr.bf16.mxu0 0
  %1621 = vmatmul.mubr.bf16.gmra.mrb[0].mxu0 %v971
  %v1622 = vpop.f32.mrb[0].mxu0
  %v1623 = vadd.f32 %v1487, %v1622
  %v1624 = vpop.f32.mrb[0].mxu0
  %v1625 = vpop.f32.mrb[0].mxu0
  %v1626 = vadd.f32 %v1490, %v1625
  %v1627 = vpop.f32.mrb[0].mxu0
  %1628 = vmatprep.mubr.bf16.mxu0 0
  %1629 = vmatmul.mubr.bf16.gmra.mrb[0].mxu0 %v972
  %v1630 = vpop.f32.mrb[0].mxu0
  %v1631 = vadd.f32 %v1495, %v1630
  %v1632 = vpop.f32.mrb[0].mxu0
  %v1633 = vpop.f32.mrb[0].mxu0
  %v1634 = vpop.f32.mrb[0].mxu0
  %1635 = vdwg.mxu0
  %s1636 = scalar_lea.vmem %s3, 416
  %v1637 = vld [vmem:[%s1636] sm:$0xff]
  %v1638 = vld [vmem:[%s1636 + $0x8] sm:$0xff]
  %v1639 = vld [vmem:[%s1636 + $0x10] sm:$0xff]
  %v1640 = vld [vmem:[%s1636 + $0x18] sm:$0xff]
  %v1641 = vld [vmem:[%s1636 + $0x20] sm:$0xff]
  %v1642 = vld [vmem:[%s1636 + $0x28] sm:$0xff]
  %v1643 = vld [vmem:[%s1636 + $0x30] sm:$0xff]
  %v1644 = vld [vmem:[%s1636 + $0x38] sm:$0xff]
  %v1645 = vld [vmem:[%s1636 + $0x40] sm:$0xff]
  %v1646 = vld [vmem:[%s1636 + $0x48] sm:$0xff]
  %v1647 = vld [vmem:[%s1636 + $0x50] sm:$0xff]
  %v1648 = vld [vmem:[%s1636 + $0x58] sm:$0xff]
  %v1649 = vld [vmem:[%s1636 + $0x60] sm:$0xff]
  %v1650 = vld [vmem:[%s1636 + $0x68] sm:$0xff]
  %v1651 = vld [vmem:[%s1636 + $0x70] sm:$0xff]
  %v1652 = vld [vmem:[%s1636 + $0x78] sm:$0xff]
  %v1653 = vld [vmem:[%s1636 + $0x80] sm:$0xff]
  %v1654 = vld [vmem:[%s1636 + $0x88] sm:$0xff]
  %v1655 = vld [vmem:[%s1636 + $0x90] sm:$0xff]
  %v1656 = vld [vmem:[%s1636 + $0x98] sm:$0xff]
  %v1657 = vld [vmem:[%s1636 + $0xa0] sm:$0xff]
  %v1658 = vld [vmem:[%s1636 + $0xa8] sm:$0xff]
  %v1659 = vld [vmem:[%s1636 + $0xb0] sm:$0xff]
  %v1660 = vld [vmem:[%s1636 + $0xb8] sm:$0xff]
  %v1661 = vld [vmem:[%s1636 + $0xc0] sm:$0xff]
  %v1662 = vld [vmem:[%s1636 + $0xc8] sm:$0xff]
  %v1689 = vunpack.c.l.b16 %v1637
  %v1690 = vunpack.c.h.b16 %v1637
  %v1691 = vunpack.c.l.b16 %v1638
  %v1692 = vunpack.c.h.b16 %v1638
  %v1693 = vunpack.c.l.b16 %v1639
  %v1694 = vunpack.c.h.b16 %v1639
  %v1695 = vunpack.c.l.b16 %v1640
  %v1696 = vunpack.c.h.b16 %v1640
  %v1697 = vunpack.c.l.b16 %v1641
  %v1698 = vunpack.c.h.b16 %v1641
  %v1699 = vunpack.c.l.b16 %v1642
  %v1700 = vunpack.c.h.b16 %v1642
  %v1701 = vunpack.c.l.b16 %v1643
  %v1702 = vunpack.c.h.b16 %v1643
  %v1703 = vunpack.c.l.b16 %v1644
  %v1704 = vunpack.c.h.b16 %v1644
  %v1705 = vunpack.c.l.b16 %v1645
  %v1706 = vunpack.c.h.b16 %v1645
  %v1707 = vunpack.c.l.b16 %v1646
  %v1708 = vunpack.c.h.b16 %v1646
  %v1709 = vunpack.c.l.b16 %v1647
  %v1710 = vunpack.c.h.b16 %v1647
  %v1711 = vunpack.c.l.b16 %v1648
  %v1712 = vunpack.c.h.b16 %v1648
  %v1713 = vunpack.c.l.b16 %v1649
  %v1714 = vunpack.c.h.b16 %v1649
  %v1715 = vunpack.c.l.b16 %v1650
  %v1716 = vunpack.c.h.b16 %v1650
  %v1717 = vunpack.c.l.b16 %v1651
  %v1718 = vunpack.c.h.b16 %v1651
  %v1719 = vunpack.c.l.b16 %v1652
  %v1720 = vunpack.c.h.b16 %v1652
  %v1721 = vunpack.c.l.b16 %v1653
  %v1722 = vunpack.c.h.b16 %v1653
  %v1723 = vunpack.c.l.b16 %v1654
  %v1724 = vunpack.c.h.b16 %v1654
  %v1725 = vunpack.c.l.b16 %v1655
  %v1726 = vunpack.c.h.b16 %v1655
  %v1727 = vunpack.c.l.b16 %v1656
  %v1728 = vunpack.c.h.b16 %v1656
  %v1729 = vunpack.c.l.b16 %v1657
  %v1730 = vunpack.c.h.b16 %v1657
  %v1731 = vunpack.c.l.b16 %v1658
  %v1732 = vunpack.c.h.b16 %v1658
  %v1733 = vunpack.c.l.b16 %v1659
  %v1734 = vunpack.c.h.b16 %v1659
  %v1735 = vunpack.c.l.b16 %v1660
  %v1736 = vunpack.c.h.b16 %v1660
  %v1737 = vunpack.c.l.b16 %v1661
  %v1738 = vunpack.c.h.b16 %v1661
  %v1739 = vunpack.c.l.b16 %v1662
  %v1740 = vunpack.c.h.b16 %v1662
  %v1741 = vpack.c.b16 %v1693, %v1689
  %v1742 = vpack.c.b16 %v1694, %v1690
  %v1743 = vpack.c.b16 %v1695, %v1691
  %v1744 = vpack.c.b16 %v1696, %v1692
  %v1745 = vpack.c.b16 %v1701, %v1697
  %v1746 = vpack.c.b16 %v1702, %v1698
  %v1747 = vpack.c.b16 %v1703, %v1699
  %v1748 = vpack.c.b16 %v1704, %v1700
  %v1749 = vpack.c.b16 %v1709, %v1705
  %v1750 = vpack.c.b16 %v1710, %v1706
  %v1751 = vpack.c.b16 %v1711, %v1707
  %v1752 = vpack.c.b16 %v1712, %v1708
  %v1753 = vpack.c.b16 %v1717, %v1713
  %v1754 = vpack.c.b16 %v1718, %v1714
  %v1755 = vpack.c.b16 %v1719, %v1715
  %v1756 = vpack.c.b16 %v1720, %v1716
  %v1757 = vpack.c.b16 %v1725, %v1721
  %v1758 = vpack.c.b16 %v1726, %v1722
  %v1759 = vpack.c.b16 %v1727, %v1723
  %v1760 = vpack.c.b16 %v1728, %v1724
  %v1761 = vpack.c.b16 %v1733, %v1729
  %v1762 = vpack.c.b16 %v1734, %v1730
  %v1763 = vpack.c.b16 %v1735, %v1731
  %v1764 = vpack.c.b16 %v1736, %v1732
  %v1765 = vpack.c.b16 %v1737, %v1737
  %v1766 = vpack.c.b16 %v1738, %v1738
  %v1767 = vpack.c.b16 %v1739, %v1739
  %v1768 = vpack.c.b16 %v1740, %v1740
  %v1791 = vsel %vm764, %v1744, 0
  %v1794 = vsel %vm764, %v1748, 0
  %v1797 = vsel %vm764, %v1752, 0
  %v1800 = vsel %vm764, %v1756, 0
  %v1803 = vsel %vm764, %v1760, 0
  %v1806 = vsel %vm764, %v1764, 0
  %v1809 = vsel %vm764, %v1768, 0
  %1811 = vmatprep.subr.bf16.mxu0 0
  %1812 = vmatpush1.bf16.msra.mxu0 %v586
  %1813 = vmatprep.subr.bf16.mxu0 0
  %1814 = vmatpush1.bf16.msra.mxu0 %v587
  %1815 = vmatprep.subr.bf16.mxu0 0
  %1816 = vmatpush1.bf16.msra.mxu0 %v588
  %1817 = vmatprep.subr.bf16.mxu0 0
  %1818 = vmatpush1.bf16.msra.mxu0 %v589
  %1819 = vmatprep.subr.bf16.mxu0 0
  %1820 = vmatpush1.bf16.msra.mxu0 %v590
  %1821 = vmatprep.subr.bf16.mxu0 0
  %1822 = vmatpush1.bf16.msra.mxu0 %v591
  %1823 = vmatprep.subr.bf16.mxu0 0
  %1824 = vmatpush1.bf16.msra.mxu0 %v592
  %1825 = vmatprep.subr.bf16.mxu0 0
  %1826 = vmatpush1.bf16.msra.mxu0 %v593
  %1827 = vmatprep.subr.bf16.mxu0 0
  %1828 = vmatpush1.bf16.msra.mxu0 %v594
  %1829 = vmatprep.subr.bf16.mxu0 0
  %1830 = vmatpush1.bf16.msra.mxu0 %v595
  %1831 = vmatprep.subr.bf16.mxu0 0
  %1832 = vmatpush1.bf16.msra.mxu0 %v596
  %1833 = vmatprep.subr.bf16.mxu0 0
  %1834 = vmatpush1.bf16.msra.mxu0 %v597
  %1835 = vmatprep.subr.bf16.mxu0 0
  %1836 = vmatpush1.bf16.msra.mxu0 %v598
  %1837 = vmatprep.subr.bf16.mxu0 0
  %1838 = vmatpush1.bf16.msra.mxu0 %v599
  %1839 = vmatprep.subr.bf16.mxu0 0
  %1840 = vmatpush1.bf16.msra.mxu0 %v600
  %1841 = vmatprep.subr.bf16.mxu0 0
  %1842 = vmatpush1.bf16.msra.mxu0 %v601
  %1843 = vmatprep.mubr.bf16.mxu0 %v1742
  %1844 = vmatmul.mubr.bf16.gmra.mrb[0].mxu0 %v1741
  %v1845 = vpop.f32.mrb[0].mxu0
  %v1846 = vadd.f32 0.0, %v1845
  %v1847 = vpop.f32.mrb[0].mxu0
  %v1848 = vpop.f32.mrb[0].mxu0
  %v1849 = vadd.f32 0.0, %v1848
  %v1850 = vpop.f32.mrb[0].mxu0
  %1851 = vmatprep.mubr.bf16.mxu0 %v1746
  %1852 = vmatmul.mubr.bf16.gmra.mrb[0].mxu0 %v1745
  %v1853 = vpop.f32.mrb[0].mxu0
  %v1854 = vadd.f32 0.0, %v1853
  %v1855 = vpop.f32.mrb[0].mxu0
  %v1856 = vpop.f32.mrb[0].mxu0
  %v1857 = vadd.f32 0.0, %v1856
  %v1858 = vpop.f32.mrb[0].mxu0
  %1859 = vmatprep.mubr.bf16.mxu0 %v1750
  %1860 = vmatmul.mubr.bf16.gmra.mrb[0].mxu0 %v1749
  %v1861 = vpop.f32.mrb[0].mxu0
  %v1862 = vadd.f32 0.0, %v1861
  %v1863 = vpop.f32.mrb[0].mxu0
  %v1864 = vpop.f32.mrb[0].mxu0
  %v1865 = vadd.f32 0.0, %v1864
  %v1866 = vpop.f32.mrb[0].mxu0
  %1867 = vmatprep.mubr.bf16.mxu0 %v1754
  %1868 = vmatmul.mubr.bf16.gmra.mrb[0].mxu0 %v1753
  %v1869 = vpop.f32.mrb[0].mxu0
  %v1870 = vadd.f32 0.0, %v1869
  %v1871 = vpop.f32.mrb[0].mxu0
  %v1872 = vpop.f32.mrb[0].mxu0
  %v1873 = vadd.f32 0.0, %v1872
  %v1874 = vpop.f32.mrb[0].mxu0
  %1875 = vmatprep.mubr.bf16.mxu0 %v1758
  %1876 = vmatmul.mubr.bf16.gmra.mrb[0].mxu0 %v1757
  %v1877 = vpop.f32.mrb[0].mxu0
  %v1878 = vadd.f32 0.0, %v1877
  %v1879 = vpop.f32.mrb[0].mxu0
  %v1880 = vpop.f32.mrb[0].mxu0
  %v1881 = vadd.f32 0.0, %v1880
  %v1882 = vpop.f32.mrb[0].mxu0
  %1883 = vmatprep.mubr.bf16.mxu0 %v1762
  %1884 = vmatmul.mubr.bf16.gmra.mrb[0].mxu0 %v1761
  %v1885 = vpop.f32.mrb[0].mxu0
  %v1886 = vadd.f32 0.0, %v1885
  %v1887 = vpop.f32.mrb[0].mxu0
  %v1888 = vpop.f32.mrb[0].mxu0
  %v1889 = vadd.f32 0.0, %v1888
  %v1890 = vpop.f32.mrb[0].mxu0
  %1891 = vmatprep.mubr.bf16.mxu0 %v1766
  %1892 = vmatmul.mubr.bf16.gmra.mrb[0].mxu0 %v1765
  %v1893 = vpop.f32.mrb[0].mxu0
  %v1894 = vadd.f32 0.0, %v1893
  %v1895 = vpop.f32.mrb[0].mxu0
  %v1896 = vpop.f32.mrb[0].mxu0
  %v1897 = vpop.f32.mrb[0].mxu0
  %1898 = vdwg.mxu0
  %1899 = vmatprep.subr.bf16.mxu0 0
  %1900 = vmatpush1.bf16.msra.mxu0 %v602
  %1901 = vmatprep.subr.bf16.mxu0 0
  %1902 = vmatpush1.bf16.msra.mxu0 %v603
  %1903 = vmatprep.subr.bf16.mxu0 0
  %1904 = vmatpush1.bf16.msra.mxu0 %v604
  %1905 = vmatprep.subr.bf16.mxu0 0
  %1906 = vmatpush1.bf16.msra.mxu0 %v605
  %1907 = vmatprep.subr.bf16.mxu0 0
  %1908 = vmatpush1.bf16.msra.mxu0 %v606
  %1909 = vmatprep.subr.bf16.mxu0 0
  %1910 = vmatpush1.bf16.msra.mxu0 %v607
  %1911 = vmatprep.subr.bf16.mxu0 0
  %1912 = vmatpush1.bf16.msra.mxu0 %v608
  %1913 = vmatprep.subr.bf16.mxu0 0
  %1914 = vmatpush1.bf16.msra.mxu0 %v609
  %1915 = vmatprep.subr.bf16.mxu0 0
  %1916 = vmatpush1.bf16.msra.mxu0 %v788
  %1917 = vmatprep.subr.bf16.mxu0 0
  %1918 = vmatpush1.bf16.msra.mxu0 0
  %1919 = vmatprep.subr.bf16.mxu0 0
  %1920 = vmatpush1.bf16.msra.mxu0 0
  %1921 = vmatprep.subr.bf16.mxu0 0
  %1922 = vmatpush1.bf16.msra.mxu0 0
  %1923 = vmatprep.subr.bf16.mxu0 0
  %1924 = vmatpush1.bf16.msra.mxu0 0
  %1925 = vmatprep.subr.bf16.mxu0 0
  %1926 = vmatpush1.bf16.msra.mxu0 0
  %1927 = vmatprep.subr.bf16.mxu0 0
  %1928 = vmatpush1.bf16.msra.mxu0 0
  %1929 = vmatprep.subr.bf16.mxu0 0
  %1930 = vmatpush1.bf16.msra.mxu0 0
  %1931 = vmatprep.mubr.bf16.mxu0 %v1791
  %1932 = vmatmul.mubr.bf16.gmra.mrb[0].mxu0 %v1743
  %v1933 = vpop.f32.mrb[0].mxu0
  %v1934 = vadd.f32 %v1846, %v1933
  %v1935 = vpop.f32.mrb[0].mxu0
  %v1936 = vpop.f32.mrb[0].mxu0
  %v1937 = vadd.f32 %v1849, %v1936
  %v1938 = vpop.f32.mrb[0].mxu0
  %1939 = vmatprep.mubr.bf16.mxu0 %v1794
  %1940 = vmatmul.mubr.bf16.gmra.mrb[0].mxu0 %v1747
  %v1941 = vpop.f32.mrb[0].mxu0
  %v1942 = vadd.f32 %v1854, %v1941
  %v1943 = vpop.f32.mrb[0].mxu0
  %v1944 = vpop.f32.mrb[0].mxu0
  %v1945 = vadd.f32 %v1857, %v1944
  %v1946 = vpop.f32.mrb[0].mxu0
  %1947 = vmatprep.mubr.bf16.mxu0 %v1797
  %1948 = vmatmul.mubr.bf16.gmra.mrb[0].mxu0 %v1751
  %v1949 = vpop.f32.mrb[0].mxu0
  %v1950 = vadd.f32 %v1862, %v1949
  %v1951 = vpop.f32.mrb[0].mxu0
  %v1952 = vpop.f32.mrb[0].mxu0
  %v1953 = vadd.f32 %v1865, %v1952
  %v1954 = vpop.f32.mrb[0].mxu0
  %1955 = vmatprep.mubr.bf16.mxu0 %v1800
  %1956 = vmatmul.mubr.bf16.gmra.mrb[0].mxu0 %v1755
  %v1957 = vpop.f32.mrb[0].mxu0
  %v1958 = vadd.f32 %v1870, %v1957
  %v1959 = vpop.f32.mrb[0].mxu0
  %v1960 = vpop.f32.mrb[0].mxu0
  %v1961 = vadd.f32 %v1873, %v1960
  %v1962 = vpop.f32.mrb[0].mxu0
  %1963 = vmatprep.mubr.bf16.mxu0 %v1803
  %1964 = vmatmul.mubr.bf16.gmra.mrb[0].mxu0 %v1759
  %v1965 = vpop.f32.mrb[0].mxu0
  %v1966 = vadd.f32 %v1878, %v1965
  %v1967 = vpop.f32.mrb[0].mxu0
  %v1968 = vpop.f32.mrb[0].mxu0
  %v1969 = vadd.f32 %v1881, %v1968
  %v1970 = vpop.f32.mrb[0].mxu0
  %1971 = vmatprep.mubr.bf16.mxu0 %v1806
  %1972 = vmatmul.mubr.bf16.gmra.mrb[0].mxu0 %v1763
  %v1973 = vpop.f32.mrb[0].mxu0
  %v1974 = vadd.f32 %v1886, %v1973
  %v1975 = vpop.f32.mrb[0].mxu0
  %v1976 = vpop.f32.mrb[0].mxu0
  %v1977 = vadd.f32 %v1889, %v1976
  %v1978 = vpop.f32.mrb[0].mxu0
  %1979 = vmatprep.mubr.bf16.mxu0 %v1809
  %1980 = vmatmul.mubr.bf16.gmra.mrb[0].mxu0 %v1767
  %v1981 = vpop.f32.mrb[0].mxu0
  %v1982 = vadd.f32 %v1894, %v1981
  %v1983 = vpop.f32.mrb[0].mxu0
  %v1984 = vpop.f32.mrb[0].mxu0
  %v1985 = vpop.f32.mrb[0].mxu0
  %1986 = vdwg.mxu0
  %v1987 = vpack.c.bf16 %v1937, %v1934
  %v1988 = vpack.c.bf16 %v1945, %v1942
  %v1989 = vpack.c.bf16 %v1953, %v1950
  %v1990 = vpack.c.bf16 %v1961, %v1958
  %v1991 = vpack.c.bf16 %v1969, %v1966
  %v1992 = vpack.c.bf16 %v1977, %v1974
  %v1993 = vpack.c.bf16 %v1982, %v1982
  %s1994 = scalar_lea.vmem %s4, 128
  %v1995 = vld [vmem:[%s1994] sm:$0xf]
  %v1996 = vld [vmem:[%s1994 + $0x4] sm:$0xf]
  %v1997 = vld [vmem:[%s1994 + $0x8] sm:$0xf]
  %v1998 = vld [vmem:[%s1994 + $0xc] sm:$0xf]
  %v1999 = vld [vmem:[%s1994 + $0x10] sm:$0xf]
  %v2000 = vld [vmem:[%s1994 + $0x14] sm:$0xf]
  %v2001 = vld [vmem:[%s1994 + $0x18] sm:$0xf]
  %v2002 = vld [vmem:[%s1994 + $0x1c] sm:$0xf]
  %v2003 = vld [vmem:[%s1994 + $0x20] sm:$0xf]
  %v2004 = vld [vmem:[%s1994 + $0x24] sm:$0xf]
  %v2005 = vld [vmem:[%s1994 + $0x28] sm:$0xf]
  %v2006 = vld [vmem:[%s1994 + $0x2c] sm:$0xf]
  %v2007 = vld [vmem:[%s1994 + $0x30] sm:$0xf]
  %v2008 = vld [vmem:[%s1994 + $0x34] sm:$0xf]
  %v2009 = vld [vmem:[%s1994 + $0x38] sm:$0xf]
  %v2010 = vld [vmem:[%s1994 + $0x3c] sm:$0xf]
  %v2027 = vunpack.c.l.b16 %v1995
  %v2028 = vunpack.c.l.b16 %v1996
  %v2029 = vunpack.c.l.b16 %v1997
  %v2030 = vunpack.c.l.b16 %v1998
  %v2031 = vunpack.c.l.b16 %v1999
  %v2032 = vunpack.c.l.b16 %v2000
  %v2033 = vunpack.c.l.b16 %v2001
  %v2034 = vunpack.c.l.b16 %v2002
  %v2035 = vunpack.c.l.b16 %v2003
  %v2036 = vunpack.c.l.b16 %v2004
  %v2037 = vunpack.c.l.b16 %v2005
  %v2038 = vunpack.c.l.b16 %v2006
  %v2039 = vunpack.c.l.b16 %v2007
  %v2040 = vunpack.c.l.b16 %v2008
  %v2041 = vunpack.c.l.b16 %v2009
  %v2042 = vunpack.c.l.b16 %v2010
  %v2043 = vpack.c.b16 %v2028, %v2027
  %v2044 = vpack.c.b16 %v2030, %v2029
  %v2045 = vpack.c.b16 %v2032, %v2031
  %v2046 = vpack.c.b16 %v2034, %v2033
  %v2047 = vpack.c.b16 %v2036, %v2035
  %v2048 = vpack.c.b16 %v2038, %v2037
  %v2049 = vpack.c.b16 %v2040, %v2039
  %v2050 = vpack.c.b16 %v2042, %v2041
  %2059 = vmatprep.subr.bf16.mxu0 0
  %2060 = vmatpush1.bf16.msra.mxu0 %v2043
  %2061 = vmatprep.subr.bf16.mxu0 0
  %2062 = vmatpush1.bf16.msra.mxu0 %v2044
  %2063 = vmatprep.subr.bf16.mxu0 0
  %2064 = vmatpush1.bf16.msra.mxu0 %v2045
  %2065 = vmatprep.subr.bf16.mxu0 0
  %2066 = vmatpush1.bf16.msra.mxu0 %v2046
  %2067 = vmatprep.subr.bf16.mxu0 0
  %2068 = vmatpush1.bf16.msra.mxu0 %v2047
  %2069 = vmatprep.subr.bf16.mxu0 0
  %2070 = vmatpush1.bf16.msra.mxu0 %v2048
  %2071 = vmatprep.subr.bf16.mxu0 0
  %2072 = vmatpush1.bf16.msra.mxu0 %v2049
  %2073 = vmatprep.subr.bf16.mxu0 0
  %2074 = vmatpush1.bf16.msra.mxu0 %v2050
  %2075 = vmatprep.subr.bf16.mxu0 0
  %2076 = vmatpush1.bf16.msra.mxu0 0
  %2077 = vmatprep.subr.bf16.mxu0 0
  %2078 = vmatpush1.bf16.msra.mxu0 0
  %2079 = vmatprep.subr.bf16.mxu0 0
  %2080 = vmatpush1.bf16.msra.mxu0 0
  %2081 = vmatprep.subr.bf16.mxu0 0
  %2082 = vmatpush1.bf16.msra.mxu0 0
  %2083 = vmatprep.subr.bf16.mxu0 0
  %2084 = vmatpush1.bf16.msra.mxu0 0
  %2085 = vmatprep.subr.bf16.mxu0 0
  %2086 = vmatpush1.bf16.msra.mxu0 0
  %2087 = vmatprep.subr.bf16.mxu0 0
  %2088 = vmatpush1.bf16.msra.mxu0 0
  %2089 = vmatprep.subr.bf16.mxu0 0
  %2090 = vmatpush1.bf16.msra.mxu0 0
  %2091 = vmatprep.mubr.bf16.mxu0 0
  %2092 = vmatmul.mubr.bf16.gmra.mrb[0].mxu0 %v1987
  %v2093 = vpop.f32.mrb[0].mxu0
  %v2094 = vadd.f32 0.0, %v2093
  %v2095 = vpop.f32.mrb[0].mxu0
  %v2096 = vpop.f32.mrb[0].mxu0
  %v2097 = vadd.f32 0.0, %v2096
  %v2098 = vpop.f32.mrb[0].mxu0
  %2099 = vmatprep.mubr.bf16.mxu0 0
  %2100 = vmatmul.mubr.bf16.gmra.mrb[0].mxu0 %v1988
  %v2101 = vpop.f32.mrb[0].mxu0
  %v2102 = vadd.f32 0.0, %v2101
  %v2103 = vpop.f32.mrb[0].mxu0
  %v2104 = vpop.f32.mrb[0].mxu0
  %v2105 = vadd.f32 0.0, %v2104
  %v2106 = vpop.f32.mrb[0].mxu0
  %2107 = vmatprep.mubr.bf16.mxu0 0
  %2108 = vmatmul.mubr.bf16.gmra.mrb[0].mxu0 %v1989
  %v2109 = vpop.f32.mrb[0].mxu0
  %v2110 = vadd.f32 0.0, %v2109
  %v2111 = vpop.f32.mrb[0].mxu0
  %v2112 = vpop.f32.mrb[0].mxu0
  %v2113 = vadd.f32 0.0, %v2112
  %v2114 = vpop.f32.mrb[0].mxu0
  %2115 = vmatprep.mubr.bf16.mxu0 0
  %2116 = vmatmul.mubr.bf16.gmra.mrb[0].mxu0 %v1990
  %v2117 = vpop.f32.mrb[0].mxu0
  %v2118 = vadd.f32 0.0, %v2117
  %v2119 = vpop.f32.mrb[0].mxu0
  %v2120 = vpop.f32.mrb[0].mxu0
  %v2121 = vadd.f32 0.0, %v2120
  %v2122 = vpop.f32.mrb[0].mxu0
  %2123 = vmatprep.mubr.bf16.mxu0 0
  %2124 = vmatmul.mubr.bf16.gmra.mrb[0].mxu0 %v1991
  %v2125 = vpop.f32.mrb[0].mxu0
  %v2126 = vadd.f32 0.0, %v2125
  %v2127 = vpop.f32.mrb[0].mxu0
  %v2128 = vpop.f32.mrb[0].mxu0
  %v2129 = vadd.f32 0.0, %v2128
  %v2130 = vpop.f32.mrb[0].mxu0
  %2131 = vmatprep.mubr.bf16.mxu0 0
  %2132 = vmatmul.mubr.bf16.gmra.mrb[0].mxu0 %v1992
  %v2133 = vpop.f32.mrb[0].mxu0
  %v2134 = vadd.f32 0.0, %v2133
  %v2135 = vpop.f32.mrb[0].mxu0
  %v2136 = vpop.f32.mrb[0].mxu0
  %v2137 = vadd.f32 0.0, %v2136
  %v2138 = vpop.f32.mrb[0].mxu0
  %2139 = vmatprep.mubr.bf16.mxu0 0
  %2140 = vmatmul.mubr.bf16.gmra.mrb[0].mxu0 %v1993
  %v2141 = vpop.f32.mrb[0].mxu0
  %v2142 = vadd.f32 0.0, %v2141
  %v2143 = vpop.f32.mrb[0].mxu0
  %v2144 = vpop.f32.mrb[0].mxu0
  %v2145 = vpop.f32.mrb[0].mxu0
  %2146 = vdwg.mxu0
  %v2147 = vadd.f32 %v1583, %v2094
  %v2148 = vadd.f32 %v1586, %v2097
  %v2149 = vadd.f32 %v1591, %v2102
  %v2150 = vadd.f32 %v1594, %v2105
  %v2151 = vadd.f32 %v1599, %v2110
  %v2152 = vadd.f32 %v1602, %v2113
  %v2153 = vadd.f32 %v1607, %v2118
  %v2154 = vadd.f32 %v1610, %v2121
  %v2155 = vadd.f32 %v1615, %v2126
  %v2156 = vadd.f32 %v1618, %v2129
  %v2157 = vadd.f32 %v1623, %v2134
  %v2158 = vadd.f32 %v1626, %v2137
  %v2159 = vadd.f32 %v1631, %v2142
  %s2160 = scalar_lea.vmem %s3, 624
  %v2161 = vld [vmem:[%s2160] sm:$0xff]
  %v2162 = vld [vmem:[%s2160 + $0x8] sm:$0xff]
  %v2163 = vld [vmem:[%s2160 + $0x10] sm:$0xff]
  %v2164 = vld [vmem:[%s2160 + $0x18] sm:$0xff]
  %v2165 = vld [vmem:[%s2160 + $0x20] sm:$0xff]
  %v2166 = vld [vmem:[%s2160 + $0x28] sm:$0xff]
  %v2167 = vld [vmem:[%s2160 + $0x30] sm:$0xff]
  %v2168 = vld [vmem:[%s2160 + $0x38] sm:$0xff]
  %v2169 = vld [vmem:[%s2160 + $0x40] sm:$0xff]
  %v2170 = vld [vmem:[%s2160 + $0x48] sm:$0xff]
  %v2171 = vld [vmem:[%s2160 + $0x50] sm:$0xff]
  %v2172 = vld [vmem:[%s2160 + $0x58] sm:$0xff]
  %v2173 = vld [vmem:[%s2160 + $0x60] sm:$0xff]
  %v2174 = vld [vmem:[%s2160 + $0x68] sm:$0xff]
  %v2175 = vld [vmem:[%s2160 + $0x70] sm:$0xff]
  %v2176 = vld [vmem:[%s2160 + $0x78] sm:$0xff]
  %v2177 = vld [vmem:[%s2160 + $0x80] sm:$0xff]
  %v2178 = vld [vmem:[%s2160 + $0x88] sm:$0xff]
  %v2179 = vld [vmem:[%s2160 + $0x90] sm:$0xff]
  %v2180 = vld [vmem:[%s2160 + $0x98] sm:$0xff]
  %v2181 = vld [vmem:[%s2160 + $0xa0] sm:$0xff]
  %v2182 = vld [vmem:[%s2160 + $0xa8] sm:$0xff]
  %v2183 = vld [vmem:[%s2160 + $0xb0] sm:$0xff]
  %v2184 = vld [vmem:[%s2160 + $0xb8] sm:$0xff]
  %v2185 = vld [vmem:[%s2160 + $0xc0] sm:$0xff]
  %v2186 = vld [vmem:[%s2160 + $0xc8] sm:$0xff]
  %v2213 = vunpack.c.l.b16 %v2161
  %v2214 = vunpack.c.h.b16 %v2161
  %v2215 = vunpack.c.l.b16 %v2162
  %v2216 = vunpack.c.h.b16 %v2162
  %v2217 = vunpack.c.l.b16 %v2163
  %v2218 = vunpack.c.h.b16 %v2163
  %v2219 = vunpack.c.l.b16 %v2164
  %v2220 = vunpack.c.h.b16 %v2164
  %v2221 = vunpack.c.l.b16 %v2165
  %v2222 = vunpack.c.h.b16 %v2165
  %v2223 = vunpack.c.l.b16 %v2166
  %v2224 = vunpack.c.h.b16 %v2166
  %v2225 = vunpack.c.l.b16 %v2167
  %v2226 = vunpack.c.h.b16 %v2167
  %v2227 = vunpack.c.l.b16 %v2168
  %v2228 = vunpack.c.h.b16 %v2168
  %v2229 = vunpack.c.l.b16 %v2169
  %v2230 = vunpack.c.h.b16 %v2169
  %v2231 = vunpack.c.l.b16 %v2170
  %v2232 = vunpack.c.h.b16 %v2170
  %v2233 = vunpack.c.l.b16 %v2171
  %v2234 = vunpack.c.h.b16 %v2171
  %v2235 = vunpack.c.l.b16 %v2172
  %v2236 = vunpack.c.h.b16 %v2172
  %v2237 = vunpack.c.l.b16 %v2173
  %v2238 = vunpack.c.h.b16 %v2173
  %v2239 = vunpack.c.l.b16 %v2174
  %v2240 = vunpack.c.h.b16 %v2174
  %v2241 = vunpack.c.l.b16 %v2175
  %v2242 = vunpack.c.h.b16 %v2175
  %v2243 = vunpack.c.l.b16 %v2176
  %v2244 = vunpack.c.h.b16 %v2176
  %v2245 = vunpack.c.l.b16 %v2177
  %v2246 = vunpack.c.h.b16 %v2177
  %v2247 = vunpack.c.l.b16 %v2178
  %v2248 = vunpack.c.h.b16 %v2178
  %v2249 = vunpack.c.l.b16 %v2179
  %v2250 = vunpack.c.h.b16 %v2179
  %v2251 = vunpack.c.l.b16 %v2180
  %v2252 = vunpack.c.h.b16 %v2180
  %v2253 = vunpack.c.l.b16 %v2181
  %v2254 = vunpack.c.h.b16 %v2181
  %v2255 = vunpack.c.l.b16 %v2182
  %v2256 = vunpack.c.h.b16 %v2182
  %v2257 = vunpack.c.l.b16 %v2183
  %v2258 = vunpack.c.h.b16 %v2183
  %v2259 = vunpack.c.l.b16 %v2184
  %v2260 = vunpack.c.h.b16 %v2184
  %v2261 = vunpack.c.l.b16 %v2185
  %v2262 = vunpack.c.h.b16 %v2185
  %v2263 = vunpack.c.l.b16 %v2186
  %v2264 = vunpack.c.h.b16 %v2186
  %v2265 = vpack.c.b16 %v2217, %v2213
  %v2266 = vpack.c.b16 %v2218, %v2214
  %v2267 = vpack.c.b16 %v2219, %v2215
  %v2268 = vpack.c.b16 %v2220, %v2216
  %v2269 = vpack.c.b16 %v2225, %v2221
  %v2270 = vpack.c.b16 %v2226, %v2222
  %v2271 = vpack.c.b16 %v2227, %v2223
  %v2272 = vpack.c.b16 %v2228, %v2224
  %v2273 = vpack.c.b16 %v2233, %v2229
  %v2274 = vpack.c.b16 %v2234, %v2230
  %v2275 = vpack.c.b16 %v2235, %v2231
  %v2276 = vpack.c.b16 %v2236, %v2232
  %v2277 = vpack.c.b16 %v2241, %v2237
  %v2278 = vpack.c.b16 %v2242, %v2238
  %v2279 = vpack.c.b16 %v2243, %v2239
  %v2280 = vpack.c.b16 %v2244, %v2240
  %v2281 = vpack.c.b16 %v2249, %v2245
  %v2282 = vpack.c.b16 %v2250, %v2246
  %v2283 = vpack.c.b16 %v2251, %v2247
  %v2284 = vpack.c.b16 %v2252, %v2248
  %v2285 = vpack.c.b16 %v2257, %v2253
  %v2286 = vpack.c.b16 %v2258, %v2254
  %v2287 = vpack.c.b16 %v2259, %v2255
  %v2288 = vpack.c.b16 %v2260, %v2256
  %v2289 = vpack.c.b16 %v2261, %v2261
  %v2290 = vpack.c.b16 %v2262, %v2262
  %v2291 = vpack.c.b16 %v2263, %v2263
  %v2292 = vpack.c.b16 %v2264, %v2264
  %v2315 = vsel %vm764, %v2268, 0
  %v2318 = vsel %vm764, %v2272, 0
  %v2321 = vsel %vm764, %v2276, 0
  %v2324 = vsel %vm764, %v2280, 0
  %v2327 = vsel %vm764, %v2284, 0
  %v2330 = vsel %vm764, %v2288, 0
  %v2333 = vsel %vm764, %v2292, 0
  %2335 = vmatprep.subr.bf16.mxu0 0
  %2336 = vmatpush1.bf16.msra.mxu0 %v586
  %2337 = vmatprep.subr.bf16.mxu0 0
  %2338 = vmatpush1.bf16.msra.mxu0 %v587
  %2339 = vmatprep.subr.bf16.mxu0 0
  %2340 = vmatpush1.bf16.msra.mxu0 %v588
  %2341 = vmatprep.subr.bf16.mxu0 0
  %2342 = vmatpush1.bf16.msra.mxu0 %v589
  %2343 = vmatprep.subr.bf16.mxu0 0
  %2344 = vmatpush1.bf16.msra.mxu0 %v590
  %2345 = vmatprep.subr.bf16.mxu0 0
  %2346 = vmatpush1.bf16.msra.mxu0 %v591
  %2347 = vmatprep.subr.bf16.mxu0 0
  %2348 = vmatpush1.bf16.msra.mxu0 %v592
  %2349 = vmatprep.subr.bf16.mxu0 0
  %2350 = vmatpush1.bf16.msra.mxu0 %v593
  %2351 = vmatprep.subr.bf16.mxu0 0
  %2352 = vmatpush1.bf16.msra.mxu0 %v594
  %2353 = vmatprep.subr.bf16.mxu0 0
  %2354 = vmatpush1.bf16.msra.mxu0 %v595
  %2355 = vmatprep.subr.bf16.mxu0 0
  %2356 = vmatpush1.bf16.msra.mxu0 %v596
  %2357 = vmatprep.subr.bf16.mxu0 0
  %2358 = vmatpush1.bf16.msra.mxu0 %v597
  %2359 = vmatprep.subr.bf16.mxu0 0
  %2360 = vmatpush1.bf16.msra.mxu0 %v598
  %2361 = vmatprep.subr.bf16.mxu0 0
  %2362 = vmatpush1.bf16.msra.mxu0 %v599
  %2363 = vmatprep.subr.bf16.mxu0 0
  %2364 = vmatpush1.bf16.msra.mxu0 %v600
  %2365 = vmatprep.subr.bf16.mxu0 0
  %2366 = vmatpush1.bf16.msra.mxu0 %v601
  %2367 = vmatprep.mubr.bf16.mxu0 %v2266
  %2368 = vmatmul.mubr.bf16.gmra.mrb[0].mxu0 %v2265
  %v2369 = vpop.f32.mrb[0].mxu0
  %v2370 = vadd.f32 0.0, %v2369
  %v2371 = vpop.f32.mrb[0].mxu0
  %v2372 = vpop.f32.mrb[0].mxu0
  %v2373 = vadd.f32 0.0, %v2372
  %v2374 = vpop.f32.mrb[0].mxu0
  %2375 = vmatprep.mubr.bf16.mxu0 %v2270
  %2376 = vmatmul.mubr.bf16.gmra.mrb[0].mxu0 %v2269
  %v2377 = vpop.f32.mrb[0].mxu0
  %v2378 = vadd.f32 0.0, %v2377
  %v2379 = vpop.f32.mrb[0].mxu0
  %v2380 = vpop.f32.mrb[0].mxu0
  %v2381 = vadd.f32 0.0, %v2380
  %v2382 = vpop.f32.mrb[0].mxu0
  %2383 = vmatprep.mubr.bf16.mxu0 %v2274
  %2384 = vmatmul.mubr.bf16.gmra.mrb[0].mxu0 %v2273
  %v2385 = vpop.f32.mrb[0].mxu0
  %v2386 = vadd.f32 0.0, %v2385
  %v2387 = vpop.f32.mrb[0].mxu0
  %v2388 = vpop.f32.mrb[0].mxu0
  %v2389 = vadd.f32 0.0, %v2388
  %v2390 = vpop.f32.mrb[0].mxu0
  %2391 = vmatprep.mubr.bf16.mxu0 %v2278
  %2392 = vmatmul.mubr.bf16.gmra.mrb[0].mxu0 %v2277
  %v2393 = vpop.f32.mrb[0].mxu0
  %v2394 = vadd.f32 0.0, %v2393
  %v2395 = vpop.f32.mrb[0].mxu0
  %v2396 = vpop.f32.mrb[0].mxu0
  %v2397 = vadd.f32 0.0, %v2396
  %v2398 = vpop.f32.mrb[0].mxu0
  %2399 = vmatprep.mubr.bf16.mxu0 %v2282
  %2400 = vmatmul.mubr.bf16.gmra.mrb[0].mxu0 %v2281
  %v2401 = vpop.f32.mrb[0].mxu0
  %v2402 = vadd.f32 0.0, %v2401
  %v2403 = vpop.f32.mrb[0].mxu0
  %v2404 = vpop.f32.mrb[0].mxu0
  %v2405 = vadd.f32 0.0, %v2404
  %v2406 = vpop.f32.mrb[0].mxu0
  %2407 = vmatprep.mubr.bf16.mxu0 %v2286
  %2408 = vmatmul.mubr.bf16.gmra.mrb[0].mxu0 %v2285
  %v2409 = vpop.f32.mrb[0].mxu0
  %v2410 = vadd.f32 0.0, %v2409
  %v2411 = vpop.f32.mrb[0].mxu0
  %v2412 = vpop.f32.mrb[0].mxu0
  %v2413 = vadd.f32 0.0, %v2412
  %v2414 = vpop.f32.mrb[0].mxu0
  %2415 = vmatprep.mubr.bf16.mxu0 %v2290
  %2416 = vmatmul.mubr.bf16.gmra.mrb[0].mxu0 %v2289
  %v2417 = vpop.f32.mrb[0].mxu0
  %v2418 = vadd.f32 0.0, %v2417
  %v2419 = vpop.f32.mrb[0].mxu0
  %v2420 = vpop.f32.mrb[0].mxu0
  %v2421 = vpop.f32.mrb[0].mxu0
  %2422 = vdwg.mxu0
  %2423 = vmatprep.subr.bf16.mxu0 0
  %2424 = vmatpush1.bf16.msra.mxu0 %v602
  %2425 = vmatprep.subr.bf16.mxu0 0
  %2426 = vmatpush1.bf16.msra.mxu0 %v603
  %2427 = vmatprep.subr.bf16.mxu0 0
  %2428 = vmatpush1.bf16.msra.mxu0 %v604
  %2429 = vmatprep.subr.bf16.mxu0 0
  %2430 = vmatpush1.bf16.msra.mxu0 %v605
  %2431 = vmatprep.subr.bf16.mxu0 0
  %2432 = vmatpush1.bf16.msra.mxu0 %v606
  %2433 = vmatprep.subr.bf16.mxu0 0
  %2434 = vmatpush1.bf16.msra.mxu0 %v607
  %2435 = vmatprep.subr.bf16.mxu0 0
  %2436 = vmatpush1.bf16.msra.mxu0 %v608
  %2437 = vmatprep.subr.bf16.mxu0 0
  %2438 = vmatpush1.bf16.msra.mxu0 %v609
  %2439 = vmatprep.subr.bf16.mxu0 0
  %2440 = vmatpush1.bf16.msra.mxu0 %v788
  %2441 = vmatprep.subr.bf16.mxu0 0
  %2442 = vmatpush1.bf16.msra.mxu0 0
  %2443 = vmatprep.subr.bf16.mxu0 0
  %2444 = vmatpush1.bf16.msra.mxu0 0
  %2445 = vmatprep.subr.bf16.mxu0 0
  %2446 = vmatpush1.bf16.msra.mxu0 0
  %2447 = vmatprep.subr.bf16.mxu0 0
  %2448 = vmatpush1.bf16.msra.mxu0 0
  %2449 = vmatprep.subr.bf16.mxu0 0
  %2450 = vmatpush1.bf16.msra.mxu0 0
  %2451 = vmatprep.subr.bf16.mxu0 0
  %2452 = vmatpush1.bf16.msra.mxu0 0
  %2453 = vmatprep.subr.bf16.mxu0 0
  %2454 = vmatpush1.bf16.msra.mxu0 0
  %2455 = vmatprep.mubr.bf16.mxu0 %v2315
  %2456 = vmatmul.mubr.bf16.gmra.mrb[0].mxu0 %v2267
  %v2457 = vpop.f32.mrb[0].mxu0
  %v2458 = vadd.f32 %v2370, %v2457
  %v2459 = vpop.f32.mrb[0].mxu0
  %v2460 = vpop.f32.mrb[0].mxu0
  %v2461 = vadd.f32 %v2373, %v2460
  %v2462 = vpop.f32.mrb[0].mxu0
  %2463 = vmatprep.mubr.bf16.mxu0 %v2318
  %2464 = vmatmul.mubr.bf16.gmra.mrb[0].mxu0 %v2271
  %v2465 = vpop.f32.mrb[0].mxu0
  %v2466 = vadd.f32 %v2378, %v2465
  %v2467 = vpop.f32.mrb[0].mxu0
  %v2468 = vpop.f32.mrb[0].mxu0
  %v2469 = vadd.f32 %v2381, %v2468
  %v2470 = vpop.f32.mrb[0].mxu0
  %2471 = vmatprep.mubr.bf16.mxu0 %v2321
  %2472 = vmatmul.mubr.bf16.gmra.mrb[0].mxu0 %v2275
  %v2473 = vpop.f32.mrb[0].mxu0
  %v2474 = vadd.f32 %v2386, %v2473
  %v2475 = vpop.f32.mrb[0].mxu0
  %v2476 = vpop.f32.mrb[0].mxu0
  %v2477 = vadd.f32 %v2389, %v2476
  %v2478 = vpop.f32.mrb[0].mxu0
  %2479 = vmatprep.mubr.bf16.mxu0 %v2324
  %2480 = vmatmul.mubr.bf16.gmra.mrb[0].mxu0 %v2279
  %v2481 = vpop.f32.mrb[0].mxu0
  %v2482 = vadd.f32 %v2394, %v2481
  %v2483 = vpop.f32.mrb[0].mxu0
  %v2484 = vpop.f32.mrb[0].mxu0
  %v2485 = vadd.f32 %v2397, %v2484
  %v2486 = vpop.f32.mrb[0].mxu0
  %2487 = vmatprep.mubr.bf16.mxu0 %v2327
  %2488 = vmatmul.mubr.bf16.gmra.mrb[0].mxu0 %v2283
  %v2489 = vpop.f32.mrb[0].mxu0
  %v2490 = vadd.f32 %v2402, %v2489
  %v2491 = vpop.f32.mrb[0].mxu0
  %v2492 = vpop.f32.mrb[0].mxu0
  %v2493 = vadd.f32 %v2405, %v2492
  %v2494 = vpop.f32.mrb[0].mxu0
  %2495 = vmatprep.mubr.bf16.mxu0 %v2330
  %2496 = vmatmul.mubr.bf16.gmra.mrb[0].mxu0 %v2287
  %v2497 = vpop.f32.mrb[0].mxu0
  %v2498 = vadd.f32 %v2410, %v2497
  %v2499 = vpop.f32.mrb[0].mxu0
  %v2500 = vpop.f32.mrb[0].mxu0
  %v2501 = vadd.f32 %v2413, %v2500
  %v2502 = vpop.f32.mrb[0].mxu0
  %2503 = vmatprep.mubr.bf16.mxu0 %v2333
  %2504 = vmatmul.mubr.bf16.gmra.mrb[0].mxu0 %v2291
  %v2505 = vpop.f32.mrb[0].mxu0
  %v2506 = vadd.f32 %v2418, %v2505
  %v2507 = vpop.f32.mrb[0].mxu0
  %v2508 = vpop.f32.mrb[0].mxu0
  %v2509 = vpop.f32.mrb[0].mxu0
  %2510 = vdwg.mxu0
  %v2511 = vpack.c.bf16 %v2461, %v2458
  %v2512 = vpack.c.bf16 %v2469, %v2466
  %v2513 = vpack.c.bf16 %v2477, %v2474
  %v2514 = vpack.c.bf16 %v2485, %v2482
  %v2515 = vpack.c.bf16 %v2493, %v2490
  %v2516 = vpack.c.bf16 %v2501, %v2498
  %v2517 = vpack.c.bf16 %v2506, %v2506
  %s2518 = scalar_lea.vmem %s4, 192
  %v2519 = vld [vmem:[%s2518] sm:$0xf]
  %v2520 = vld [vmem:[%s2518 + $0x4] sm:$0xf]
  %v2521 = vld [vmem:[%s2518 + $0x8] sm:$0xf]
  %v2522 = vld [vmem:[%s2518 + $0xc] sm:$0xf]
  %v2523 = vld [vmem:[%s2518 + $0x10] sm:$0xf]
  %v2524 = vld [vmem:[%s2518 + $0x14] sm:$0xf]
  %v2525 = vld [vmem:[%s2518 + $0x18] sm:$0xf]
  %v2526 = vld [vmem:[%s2518 + $0x1c] sm:$0xf]
  %v2527 = vld [vmem:[%s2518 + $0x20] sm:$0xf]
  %v2528 = vld [vmem:[%s2518 + $0x24] sm:$0xf]
  %v2529 = vld [vmem:[%s2518 + $0x28] sm:$0xf]
  %v2530 = vld [vmem:[%s2518 + $0x2c] sm:$0xf]
  %v2531 = vld [vmem:[%s2518 + $0x30] sm:$0xf]
  %v2532 = vld [vmem:[%s2518 + $0x34] sm:$0xf]
  %v2533 = vld [vmem:[%s2518 + $0x38] sm:$0xf]
  %v2534 = vld [vmem:[%s2518 + $0x3c] sm:$0xf]
  %v2551 = vunpack.c.l.b16 %v2519
  %v2552 = vunpack.c.l.b16 %v2520
  %v2553 = vunpack.c.l.b16 %v2521
  %v2554 = vunpack.c.l.b16 %v2522
  %v2555 = vunpack.c.l.b16 %v2523
  %v2556 = vunpack.c.l.b16 %v2524
  %v2557 = vunpack.c.l.b16 %v2525
  %v2558 = vunpack.c.l.b16 %v2526
  %v2559 = vunpack.c.l.b16 %v2527
  %v2560 = vunpack.c.l.b16 %v2528
  %v2561 = vunpack.c.l.b16 %v2529
  %v2562 = vunpack.c.l.b16 %v2530
  %v2563 = vunpack.c.l.b16 %v2531
  %v2564 = vunpack.c.l.b16 %v2532
  %v2565 = vunpack.c.l.b16 %v2533
  %v2566 = vunpack.c.l.b16 %v2534
  %v2567 = vpack.c.b16 %v2552, %v2551
  %v2568 = vpack.c.b16 %v2554, %v2553
  %v2569 = vpack.c.b16 %v2556, %v2555
  %v2570 = vpack.c.b16 %v2558, %v2557
  %v2571 = vpack.c.b16 %v2560, %v2559
  %v2572 = vpack.c.b16 %v2562, %v2561
  %v2573 = vpack.c.b16 %v2564, %v2563
  %v2574 = vpack.c.b16 %v2566, %v2565
  %2583 = vmatprep.subr.bf16.mxu0 0
  %2584 = vmatpush1.bf16.msra.mxu0 %v2567
  %2585 = vmatprep.subr.bf16.mxu0 0
  %2586 = vmatpush1.bf16.msra.mxu0 %v2568
  %2587 = vmatprep.subr.bf16.mxu0 0
  %2588 = vmatpush1.bf16.msra.mxu0 %v2569
  %2589 = vmatprep.subr.bf16.mxu0 0
  %2590 = vmatpush1.bf16.msra.mxu0 %v2570
  %2591 = vmatprep.subr.bf16.mxu0 0
  %2592 = vmatpush1.bf16.msra.mxu0 %v2571
  %2593 = vmatprep.subr.bf16.mxu0 0
  %2594 = vmatpush1.bf16.msra.mxu0 %v2572
  %2595 = vmatprep.subr.bf16.mxu0 0
  %2596 = vmatpush1.bf16.msra.mxu0 %v2573
  %2597 = vmatprep.subr.bf16.mxu0 0
  %2598 = vmatpush1.bf16.msra.mxu0 %v2574
  %2599 = vmatprep.subr.bf16.mxu0 0
  %2600 = vmatpush1.bf16.msra.mxu0 0
  %2601 = vmatprep.subr.bf16.mxu0 0
  %2602 = vmatpush1.bf16.msra.mxu0 0
  %2603 = vmatprep.subr.bf16.mxu0 0
  %2604 = vmatpush1.bf16.msra.mxu0 0
  %2605 = vmatprep.subr.bf16.mxu0 0
  %2606 = vmatpush1.bf16.msra.mxu0 0
  %2607 = vmatprep.subr.bf16.mxu0 0
  %2608 = vmatpush1.bf16.msra.mxu0 0
  %2609 = vmatprep.subr.bf16.mxu0 0
  %2610 = vmatpush1.bf16.msra.mxu0 0
  %2611 = vmatprep.subr.bf16.mxu0 0
  %2612 = vmatpush1.bf16.msra.mxu0 0
  %2613 = vmatprep.subr.bf16.mxu0 0
  %2614 = vmatpush1.bf16.msra.mxu0 0
  %2615 = vmatprep.mubr.bf16.mxu0 0
  %2616 = vmatmul.mubr.bf16.gmra.mrb[0].mxu0 %v2511
  %v2617 = vpop.f32.mrb[0].mxu0
  %v2618 = vadd.f32 0.0, %v2617
  %v2619 = vpop.f32.mrb[0].mxu0
  %v2620 = vpop.f32.mrb[0].mxu0
  %v2621 = vadd.f32 0.0, %v2620
  %v2622 = vpop.f32.mrb[0].mxu0
  %2623 = vmatprep.mubr.bf16.mxu0 0
  %2624 = vmatmul.mubr.bf16.gmra.mrb[0].mxu0 %v2512
  %v2625 = vpop.f32.mrb[0].mxu0
  %v2626 = vadd.f32 0.0, %v2625
  %v2627 = vpop.f32.mrb[0].mxu0
  %v2628 = vpop.f32.mrb[0].mxu0
  %v2629 = vadd.f32 0.0, %v2628
  %v2630 = vpop.f32.mrb[0].mxu0
  %2631 = vmatprep.mubr.bf16.mxu0 0
  %2632 = vmatmul.mubr.bf16.gmra.mrb[0].mxu0 %v2513
  %v2633 = vpop.f32.mrb[0].mxu0
  %v2634 = vadd.f32 0.0, %v2633
  %v2635 = vpop.f32.mrb[0].mxu0
  %v2636 = vpop.f32.mrb[0].mxu0
  %v2637 = vadd.f32 0.0, %v2636
  %v2638 = vpop.f32.mrb[0].mxu0
  %2639 = vmatprep.mubr.bf16.mxu0 0
  %2640 = vmatmul.mubr.bf16.gmra.mrb[0].mxu0 %v2514
  %v2641 = vpop.f32.mrb[0].mxu0
  %v2642 = vadd.f32 0.0, %v2641
  %v2643 = vpop.f32.mrb[0].mxu0
  %v2644 = vpop.f32.mrb[0].mxu0
  %v2645 = vadd.f32 0.0, %v2644
  %v2646 = vpop.f32.mrb[0].mxu0
  %2647 = vmatprep.mubr.bf16.mxu0 0
  %2648 = vmatmul.mubr.bf16.gmra.mrb[0].mxu0 %v2515
  %v2649 = vpop.f32.mrb[0].mxu0
  %v2650 = vadd.f32 0.0, %v2649
  %v2651 = vpop.f32.mrb[0].mxu0
  %v2652 = vpop.f32.mrb[0].mxu0
  %v2653 = vadd.f32 0.0, %v2652
  %v2654 = vpop.f32.mrb[0].mxu0
  %2655 = vmatprep.mubr.bf16.mxu0 0
  %2656 = vmatmul.mubr.bf16.gmra.mrb[0].mxu0 %v2516
  %v2657 = vpop.f32.mrb[0].mxu0
  %v2658 = vadd.f32 0.0, %v2657
  %v2659 = vpop.f32.mrb[0].mxu0
  %v2660 = vpop.f32.mrb[0].mxu0
  %v2661 = vadd.f32 0.0, %v2660
  %v2662 = vpop.f32.mrb[0].mxu0
  %2663 = vmatprep.mubr.bf16.mxu0 0
  %2664 = vmatmul.mubr.bf16.gmra.mrb[0].mxu0 %v2517
  %v2665 = vpop.f32.mrb[0].mxu0
  %v2666 = vadd.f32 0.0, %v2665
  %v2667 = vpop.f32.mrb[0].mxu0
  %v2668 = vpop.f32.mrb[0].mxu0
  %v2669 = vpop.f32.mrb[0].mxu0
  %2670 = vdwg.mxu0
  %v2671 = vadd.f32 %v2147, %v2618
  %v2672 = vadd.f32 %v2148, %v2621
  %v2673 = vadd.f32 %v2149, %v2626
  %v2674 = vadd.f32 %v2150, %v2629
  %v2675 = vadd.f32 %v2151, %v2634
  %v2676 = vadd.f32 %v2152, %v2637
  %v2677 = vadd.f32 %v2153, %v2642
  %v2678 = vadd.f32 %v2154, %v2645
  %v2679 = vadd.f32 %v2155, %v2650
  %v2680 = vadd.f32 %v2156, %v2653
  %v2681 = vadd.f32 %v2157, %v2658
  %v2682 = vadd.f32 %v2158, %v2661
  %v2683 = vadd.f32 %v2159, %v2666
  %s2684 = scalar_lea.vmem %s3, 832
  %v2685 = vld [vmem:[%s2684] sm:$0xff]
  %v2686 = vld [vmem:[%s2684 + $0x8] sm:$0xff]
  %v2687 = vld [vmem:[%s2684 + $0x10] sm:$0xff]
  %v2688 = vld [vmem:[%s2684 + $0x18] sm:$0xff]
  %v2689 = vld [vmem:[%s2684 + $0x20] sm:$0xff]
  %v2690 = vld [vmem:[%s2684 + $0x28] sm:$0xff]
  %v2691 = vld [vmem:[%s2684 + $0x30] sm:$0xff]
  %v2692 = vld [vmem:[%s2684 + $0x38] sm:$0xff]
  %v2693 = vld [vmem:[%s2684 + $0x40] sm:$0xff]
  %v2694 = vld [vmem:[%s2684 + $0x48] sm:$0xff]
  %v2695 = vld [vmem:[%s2684 + $0x50] sm:$0xff]
  %v2696 = vld [vmem:[%s2684 + $0x58] sm:$0xff]
  %v2697 = vld [vmem:[%s2684 + $0x60] sm:$0xff]
  %v2698 = vld [vmem:[%s2684 + $0x68] sm:$0xff]
  %v2699 = vld [vmem:[%s2684 + $0x70] sm:$0xff]
  %v2700 = vld [vmem:[%s2684 + $0x78] sm:$0xff]
  %v2701 = vld [vmem:[%s2684 + $0x80] sm:$0xff]
  %v2702 = vld [vmem:[%s2684 + $0x88] sm:$0xff]
  %v2703 = vld [vmem:[%s2684 + $0x90] sm:$0xff]
  %v2704 = vld [vmem:[%s2684 + $0x98] sm:$0xff]
  %v2705 = vld [vmem:[%s2684 + $0xa0] sm:$0xff]
  %v2706 = vld [vmem:[%s2684 + $0xa8] sm:$0xff]
  %v2707 = vld [vmem:[%s2684 + $0xb0] sm:$0xff]
  %v2708 = vld [vmem:[%s2684 + $0xb8] sm:$0xff]
  %v2709 = vld [vmem:[%s2684 + $0xc0] sm:$0xff]
  %v2710 = vld [vmem:[%s2684 + $0xc8] sm:$0xff]
  %v2737 = vunpack.c.l.b16 %v2685
  %v2738 = vunpack.c.h.b16 %v2685
  %v2739 = vunpack.c.l.b16 %v2686
  %v2740 = vunpack.c.h.b16 %v2686
  %v2741 = vunpack.c.l.b16 %v2687
  %v2742 = vunpack.c.h.b16 %v2687
  %v2743 = vunpack.c.l.b16 %v2688
  %v2744 = vunpack.c.h.b16 %v2688
  %v2745 = vunpack.c.l.b16 %v2689
  %v2746 = vunpack.c.h.b16 %v2689
  %v2747 = vunpack.c.l.b16 %v2690
  %v2748 = vunpack.c.h.b16 %v2690
  %v2749 = vunpack.c.l.b16 %v2691
  %v2750 = vunpack.c.h.b16 %v2691
  %v2751 = vunpack.c.l.b16 %v2692
  %v2752 = vunpack.c.h.b16 %v2692
  %v2753 = vunpack.c.l.b16 %v2693
  %v2754 = vunpack.c.h.b16 %v2693
  %v2755 = vunpack.c.l.b16 %v2694
  %v2756 = vunpack.c.h.b16 %v2694
  %v2757 = vunpack.c.l.b16 %v2695
  %v2758 = vunpack.c.h.b16 %v2695
  %v2759 = vunpack.c.l.b16 %v2696
  %v2760 = vunpack.c.h.b16 %v2696
  %v2761 = vunpack.c.l.b16 %v2697
  %v2762 = vunpack.c.h.b16 %v2697
  %v2763 = vunpack.c.l.b16 %v2698
  %v2764 = vunpack.c.h.b16 %v2698
  %v2765 = vunpack.c.l.b16 %v2699
  %v2766 = vunpack.c.h.b16 %v2699
  %v2767 = vunpack.c.l.b16 %v2700
  %v2768 = vunpack.c.h.b16 %v2700
  %v2769 = vunpack.c.l.b16 %v2701
  %v2770 = vunpack.c.h.b16 %v2701
  %v2771 = vunpack.c.l.b16 %v2702
  %v2772 = vunpack.c.h.b16 %v2702
  %v2773 = vunpack.c.l.b16 %v2703
  %v2774 = vunpack.c.h.b16 %v2703
  %v2775 = vunpack.c.l.b16 %v2704
  %v2776 = vunpack.c.h.b16 %v2704
  %v2777 = vunpack.c.l.b16 %v2705
  %v2778 = vunpack.c.h.b16 %v2705
  %v2779 = vunpack.c.l.b16 %v2706
  %v2780 = vunpack.c.h.b16 %v2706
  %v2781 = vunpack.c.l.b16 %v2707
  %v2782 = vunpack.c.h.b16 %v2707
  %v2783 = vunpack.c.l.b16 %v2708
  %v2784 = vunpack.c.h.b16 %v2708
  %v2785 = vunpack.c.l.b16 %v2709
  %v2786 = vunpack.c.h.b16 %v2709
  %v2787 = vunpack.c.l.b16 %v2710
  %v2788 = vunpack.c.h.b16 %v2710
  %v2789 = vpack.c.b16 %v2741, %v2737
  %v2790 = vpack.c.b16 %v2742, %v2738
  %v2791 = vpack.c.b16 %v2743, %v2739
  %v2792 = vpack.c.b16 %v2744, %v2740
  %v2793 = vpack.c.b16 %v2749, %v2745
  %v2794 = vpack.c.b16 %v2750, %v2746
  %v2795 = vpack.c.b16 %v2751, %v2747
  %v2796 = vpack.c.b16 %v2752, %v2748
  %v2797 = vpack.c.b16 %v2757, %v2753
  %v2798 = vpack.c.b16 %v2758, %v2754
  %v2799 = vpack.c.b16 %v2759, %v2755
  %v2800 = vpack.c.b16 %v2760, %v2756
  %v2801 = vpack.c.b16 %v2765, %v2761
  %v2802 = vpack.c.b16 %v2766, %v2762
  %v2803 = vpack.c.b16 %v2767, %v2763
  %v2804 = vpack.c.b16 %v2768, %v2764
  %v2805 = vpack.c.b16 %v2773, %v2769
  %v2806 = vpack.c.b16 %v2774, %v2770
  %v2807 = vpack.c.b16 %v2775, %v2771
  %v2808 = vpack.c.b16 %v2776, %v2772
  %v2809 = vpack.c.b16 %v2781, %v2777
  %v2810 = vpack.c.b16 %v2782, %v2778
  %v2811 = vpack.c.b16 %v2783, %v2779
  %v2812 = vpack.c.b16 %v2784, %v2780
  %v2813 = vpack.c.b16 %v2785, %v2785
  %v2814 = vpack.c.b16 %v2786, %v2786
  %v2815 = vpack.c.b16 %v2787, %v2787
  %v2816 = vpack.c.b16 %v2788, %v2788
  %v2839 = vsel %vm764, %v2792, 0
  %v2842 = vsel %vm764, %v2796, 0
  %v2845 = vsel %vm764, %v2800, 0
  %v2848 = vsel %vm764, %v2804, 0
  %v2851 = vsel %vm764, %v2808, 0
  %v2854 = vsel %vm764, %v2812, 0
  %v2857 = vsel %vm764, %v2816, 0
  %2859 = vmatprep.subr.bf16.mxu0 0
  %2860 = vmatpush1.bf16.msra.mxu0 %v586
  %2861 = vmatprep.subr.bf16.mxu0 0
  %2862 = vmatpush1.bf16.msra.mxu0 %v587
  %2863 = vmatprep.subr.bf16.mxu0 0
  %2864 = vmatpush1.bf16.msra.mxu0 %v588
  %2865 = vmatprep.subr.bf16.mxu0 0
  %2866 = vmatpush1.bf16.msra.mxu0 %v589
  %2867 = vmatprep.subr.bf16.mxu0 0
  %2868 = vmatpush1.bf16.msra.mxu0 %v590
  %2869 = vmatprep.subr.bf16.mxu0 0
  %2870 = vmatpush1.bf16.msra.mxu0 %v591
  %2871 = vmatprep.subr.bf16.mxu0 0
  %2872 = vmatpush1.bf16.msra.mxu0 %v592
  %2873 = vmatprep.subr.bf16.mxu0 0
  %2874 = vmatpush1.bf16.msra.mxu0 %v593
  %2875 = vmatprep.subr.bf16.mxu0 0
  %2876 = vmatpush1.bf16.msra.mxu0 %v594
  %2877 = vmatprep.subr.bf16.mxu0 0
  %2878 = vmatpush1.bf16.msra.mxu0 %v595
  %2879 = vmatprep.subr.bf16.mxu0 0
  %2880 = vmatpush1.bf16.msra.mxu0 %v596
  %2881 = vmatprep.subr.bf16.mxu0 0
  %2882 = vmatpush1.bf16.msra.mxu0 %v597
  %2883 = vmatprep.subr.bf16.mxu0 0
  %2884 = vmatpush1.bf16.msra.mxu0 %v598
  %2885 = vmatprep.subr.bf16.mxu0 0
  %2886 = vmatpush1.bf16.msra.mxu0 %v599
  %2887 = vmatprep.subr.bf16.mxu0 0
  %2888 = vmatpush1.bf16.msra.mxu0 %v600
  %2889 = vmatprep.subr.bf16.mxu0 0
  %2890 = vmatpush1.bf16.msra.mxu0 %v601
  %2891 = vmatprep.mubr.bf16.mxu0 %v2790
  %2892 = vmatmul.mubr.bf16.gmra.mrb[0].mxu0 %v2789
  %v2893 = vpop.f32.mrb[0].mxu0
  %v2894 = vadd.f32 0.0, %v2893
  %v2895 = vpop.f32.mrb[0].mxu0
  %v2896 = vpop.f32.mrb[0].mxu0
  %v2897 = vadd.f32 0.0, %v2896
  %v2898 = vpop.f32.mrb[0].mxu0
  %2899 = vmatprep.mubr.bf16.mxu0 %v2794
  %2900 = vmatmul.mubr.bf16.gmra.mrb[0].mxu0 %v2793
  %v2901 = vpop.f32.mrb[0].mxu0
  %v2902 = vadd.f32 0.0, %v2901
  %v2903 = vpop.f32.mrb[0].mxu0
  %v2904 = vpop.f32.mrb[0].mxu0
  %v2905 = vadd.f32 0.0, %v2904
  %v2906 = vpop.f32.mrb[0].mxu0
  %2907 = vmatprep.mubr.bf16.mxu0 %v2798
  %2908 = vmatmul.mubr.bf16.gmra.mrb[0].mxu0 %v2797
  %v2909 = vpop.f32.mrb[0].mxu0
  %v2910 = vadd.f32 0.0, %v2909
  %v2911 = vpop.f32.mrb[0].mxu0
  %v2912 = vpop.f32.mrb[0].mxu0
  %v2913 = vadd.f32 0.0, %v2912
  %v2914 = vpop.f32.mrb[0].mxu0
  %2915 = vmatprep.mubr.bf16.mxu0 %v2802
  %2916 = vmatmul.mubr.bf16.gmra.mrb[0].mxu0 %v2801
  %v2917 = vpop.f32.mrb[0].mxu0
  %v2918 = vadd.f32 0.0, %v2917
  %v2919 = vpop.f32.mrb[0].mxu0
  %v2920 = vpop.f32.mrb[0].mxu0
  %v2921 = vadd.f32 0.0, %v2920
  %v2922 = vpop.f32.mrb[0].mxu0
  %2923 = vmatprep.mubr.bf16.mxu0 %v2806
  %2924 = vmatmul.mubr.bf16.gmra.mrb[0].mxu0 %v2805
  %v2925 = vpop.f32.mrb[0].mxu0
  %v2926 = vadd.f32 0.0, %v2925
  %v2927 = vpop.f32.mrb[0].mxu0
  %v2928 = vpop.f32.mrb[0].mxu0
  %v2929 = vadd.f32 0.0, %v2928
  %v2930 = vpop.f32.mrb[0].mxu0
  %2931 = vmatprep.mubr.bf16.mxu0 %v2810
  %2932 = vmatmul.mubr.bf16.gmra.mrb[0].mxu0 %v2809
  %v2933 = vpop.f32.mrb[0].mxu0
  %v2934 = vadd.f32 0.0, %v2933
  %v2935 = vpop.f32.mrb[0].mxu0
  %v2936 = vpop.f32.mrb[0].mxu0
  %v2937 = vadd.f32 0.0, %v2936
  %v2938 = vpop.f32.mrb[0].mxu0
  %2939 = vmatprep.mubr.bf16.mxu0 %v2814
  %2940 = vmatmul.mubr.bf16.gmra.mrb[0].mxu0 %v2813
  %v2941 = vpop.f32.mrb[0].mxu0
  %v2942 = vadd.f32 0.0, %v2941
  %v2943 = vpop.f32.mrb[0].mxu0
  %v2944 = vpop.f32.mrb[0].mxu0
  %v2945 = vpop.f32.mrb[0].mxu0
  %2946 = vdwg.mxu0
  %2947 = vmatprep.subr.bf16.mxu0 0
  %2948 = vmatpush1.bf16.msra.mxu0 %v602
  %2949 = vmatprep.subr.bf16.mxu0 0
  %2950 = vmatpush1.bf16.msra.mxu0 %v603
  %2951 = vmatprep.subr.bf16.mxu0 0
  %2952 = vmatpush1.bf16.msra.mxu0 %v604
  %2953 = vmatprep.subr.bf16.mxu0 0
  %2954 = vmatpush1.bf16.msra.mxu0 %v605
  %2955 = vmatprep.subr.bf16.mxu0 0
  %2956 = vmatpush1.bf16.msra.mxu0 %v606
  %2957 = vmatprep.subr.bf16.mxu0 0
  %2958 = vmatpush1.bf16.msra.mxu0 %v607
  %2959 = vmatprep.subr.bf16.mxu0 0
  %2960 = vmatpush1.bf16.msra.mxu0 %v608
  %2961 = vmatprep.subr.bf16.mxu0 0
  %2962 = vmatpush1.bf16.msra.mxu0 %v609
  %2963 = vmatprep.subr.bf16.mxu0 0
  %2964 = vmatpush1.bf16.msra.mxu0 %v788
  %2965 = vmatprep.subr.bf16.mxu0 0
  %2966 = vmatpush1.bf16.msra.mxu0 0
  %2967 = vmatprep.subr.bf16.mxu0 0
  %2968 = vmatpush1.bf16.msra.mxu0 0
  %2969 = vmatprep.subr.bf16.mxu0 0
  %2970 = vmatpush1.bf16.msra.mxu0 0
  %2971 = vmatprep.subr.bf16.mxu0 0
  %2972 = vmatpush1.bf16.msra.mxu0 0
  %2973 = vmatprep.subr.bf16.mxu0 0
  %2974 = vmatpush1.bf16.msra.mxu0 0
  %2975 = vmatprep.subr.bf16.mxu0 0
  %2976 = vmatpush1.bf16.msra.mxu0 0
  %2977 = vmatprep.subr.bf16.mxu0 0
  %2978 = vmatpush1.bf16.msra.mxu0 0
  %2979 = vmatprep.mubr.bf16.mxu0 %v2839
  %2980 = vmatmul.mubr.bf16.gmra.mrb[0].mxu0 %v2791
  %v2981 = vpop.f32.mrb[0].mxu0
  %v2982 = vadd.f32 %v2894, %v2981
  %v2983 = vpop.f32.mrb[0].mxu0
  %v2984 = vpop.f32.mrb[0].mxu0
  %v2985 = vadd.f32 %v2897, %v2984
  %v2986 = vpop.f32.mrb[0].mxu0
  %2987 = vmatprep.mubr.bf16.mxu0 %v2842
  %2988 = vmatmul.mubr.bf16.gmra.mrb[0].mxu0 %v2795
  %v2989 = vpop.f32.mrb[0].mxu0
  %v2990 = vadd.f32 %v2902, %v2989
  %v2991 = vpop.f32.mrb[0].mxu0
  %v2992 = vpop.f32.mrb[0].mxu0
  %v2993 = vadd.f32 %v2905, %v2992
  %v2994 = vpop.f32.mrb[0].mxu0
  %2995 = vmatprep.mubr.bf16.mxu0 %v2845
  %2996 = vmatmul.mubr.bf16.gmra.mrb[0].mxu0 %v2799
  %v2997 = vpop.f32.mrb[0].mxu0
  %v2998 = vadd.f32 %v2910, %v2997
  %v2999 = vpop.f32.mrb[0].mxu0
  %v3000 = vpop.f32.mrb[0].mxu0
  %v3001 = vadd.f32 %v2913, %v3000
  %v3002 = vpop.f32.mrb[0].mxu0
  %3003 = vmatprep.mubr.bf16.mxu0 %v2848
  %3004 = vmatmul.mubr.bf16.gmra.mrb[0].mxu0 %v2803
  %v3005 = vpop.f32.mrb[0].mxu0
  %v3006 = vadd.f32 %v2918, %v3005
  %v3007 = vpop.f32.mrb[0].mxu0
  %v3008 = vpop.f32.mrb[0].mxu0
  %v3009 = vadd.f32 %v2921, %v3008
  %v3010 = vpop.f32.mrb[0].mxu0
  %3011 = vmatprep.mubr.bf16.mxu0 %v2851
  %3012 = vmatmul.mubr.bf16.gmra.mrb[0].mxu0 %v2807
  %v3013 = vpop.f32.mrb[0].mxu0
  %v3014 = vadd.f32 %v2926, %v3013
  %v3015 = vpop.f32.mrb[0].mxu0
  %v3016 = vpop.f32.mrb[0].mxu0
  %v3017 = vadd.f32 %v2929, %v3016
  %v3018 = vpop.f32.mrb[0].mxu0
  %3019 = vmatprep.mubr.bf16.mxu0 %v2854
  %3020 = vmatmul.mubr.bf16.gmra.mrb[0].mxu0 %v2811
  %v3021 = vpop.f32.mrb[0].mxu0
  %v3022 = vadd.f32 %v2934, %v3021
  %v3023 = vpop.f32.mrb[0].mxu0
  %v3024 = vpop.f32.mrb[0].mxu0
  %v3025 = vadd.f32 %v2937, %v3024
  %v3026 = vpop.f32.mrb[0].mxu0
  %3027 = vmatprep.mubr.bf16.mxu0 %v2857
  %3028 = vmatmul.mubr.bf16.gmra.mrb[0].mxu0 %v2815
  %v3029 = vpop.f32.mrb[0].mxu0
  %v3030 = vadd.f32 %v2942, %v3029
  %v3031 = vpop.f32.mrb[0].mxu0
  %v3032 = vpop.f32.mrb[0].mxu0
  %v3033 = vpop.f32.mrb[0].mxu0
  %3034 = vdwg.mxu0
  %v3035 = vpack.c.bf16 %v2985, %v2982
  %v3036 = vpack.c.bf16 %v2993, %v2990
  %v3037 = vpack.c.bf16 %v3001, %v2998
  %v3038 = vpack.c.bf16 %v3009, %v3006
  %v3039 = vpack.c.bf16 %v3017, %v3014
  %v3040 = vpack.c.bf16 %v3025, %v3022
  %v3041 = vpack.c.bf16 %v3030, %v3030
  %s3042 = scalar_lea.vmem %s4, 256
  %v3043 = vld [vmem:[%s3042] sm:$0xf]
  %v3044 = vld [vmem:[%s3042 + $0x4] sm:$0xf]
  %v3045 = vld [vmem:[%s3042 + $0x8] sm:$0xf]
  %v3046 = vld [vmem:[%s3042 + $0xc] sm:$0xf]
  %v3047 = vld [vmem:[%s3042 + $0x10] sm:$0xf]
  %v3048 = vld [vmem:[%s3042 + $0x14] sm:$0xf]
  %v3049 = vld [vmem:[%s3042 + $0x18] sm:$0xf]
  %v3050 = vld [vmem:[%s3042 + $0x1c] sm:$0xf]
  %v3051 = vld [vmem:[%s3042 + $0x20] sm:$0xf]
  %v3052 = vld [vmem:[%s3042 + $0x24] sm:$0xf]
  %v3053 = vld [vmem:[%s3042 + $0x28] sm:$0xf]
  %v3054 = vld [vmem:[%s3042 + $0x2c] sm:$0xf]
  %v3055 = vld [vmem:[%s3042 + $0x30] sm:$0xf]
  %v3056 = vld [vmem:[%s3042 + $0x34] sm:$0xf]
  %v3057 = vld [vmem:[%s3042 + $0x38] sm:$0xf]
  %v3058 = vld [vmem:[%s3042 + $0x3c] sm:$0xf]
  %v3075 = vunpack.c.l.b16 %v3043
  %v3076 = vunpack.c.l.b16 %v3044
  %v3077 = vunpack.c.l.b16 %v3045
  %v3078 = vunpack.c.l.b16 %v3046
  %v3079 = vunpack.c.l.b16 %v3047
  %v3080 = vunpack.c.l.b16 %v3048
  %v3081 = vunpack.c.l.b16 %v3049
  %v3082 = vunpack.c.l.b16 %v3050
  %v3083 = vunpack.c.l.b16 %v3051
  %v3084 = vunpack.c.l.b16 %v3052
  %v3085 = vunpack.c.l.b16 %v3053
  %v3086 = vunpack.c.l.b16 %v3054
  %v3087 = vunpack.c.l.b16 %v3055
  %v3088 = vunpack.c.l.b16 %v3056
  %v3089 = vunpack.c.l.b16 %v3057
  %v3090 = vunpack.c.l.b16 %v3058
  %v3091 = vpack.c.b16 %v3076, %v3075
  %v3092 = vpack.c.b16 %v3078, %v3077
  %v3093 = vpack.c.b16 %v3080, %v3079
  %v3094 = vpack.c.b16 %v3082, %v3081
  %v3095 = vpack.c.b16 %v3084, %v3083
  %v3096 = vpack.c.b16 %v3086, %v3085
  %v3097 = vpack.c.b16 %v3088, %v3087
  %v3098 = vpack.c.b16 %v3090, %v3089
  %3107 = vmatprep.subr.bf16.mxu0 0
  %3108 = vmatpush1.bf16.msra.mxu0 %v3091
  %3109 = vmatprep.subr.bf16.mxu0 0
  %3110 = vmatpush1.bf16.msra.mxu0 %v3092
  %3111 = vmatprep.subr.bf16.mxu0 0
  %3112 = vmatpush1.bf16.msra.mxu0 %v3093
  %3113 = vmatprep.subr.bf16.mxu0 0
  %3114 = vmatpush1.bf16.msra.mxu0 %v3094
  %3115 = vmatprep.subr.bf16.mxu0 0
  %3116 = vmatpush1.bf16.msra.mxu0 %v3095
  %3117 = vmatprep.subr.bf16.mxu0 0
  %3118 = vmatpush1.bf16.msra.mxu0 %v3096
  %3119 = vmatprep.subr.bf16.mxu0 0
  %3120 = vmatpush1.bf16.msra.mxu0 %v3097
  %3121 = vmatprep.subr.bf16.mxu0 0
  %3122 = vmatpush1.bf16.msra.mxu0 %v3098
  %3123 = vmatprep.subr.bf16.mxu0 0
  %3124 = vmatpush1.bf16.msra.mxu0 0
  %3125 = vmatprep.subr.bf16.mxu0 0
  %3126 = vmatpush1.bf16.msra.mxu0 0
  %3127 = vmatprep.subr.bf16.mxu0 0
  %3128 = vmatpush1.bf16.msra.mxu0 0
  %3129 = vmatprep.subr.bf16.mxu0 0
  %3130 = vmatpush1.bf16.msra.mxu0 0
  %3131 = vmatprep.subr.bf16.mxu0 0
  %3132 = vmatpush1.bf16.msra.mxu0 0
  %3133 = vmatprep.subr.bf16.mxu0 0
  %3134 = vmatpush1.bf16.msra.mxu0 0
  %3135 = vmatprep.subr.bf16.mxu0 0
  %3136 = vmatpush1.bf16.msra.mxu0 0
  %3137 = vmatprep.subr.bf16.mxu0 0
  %3138 = vmatpush1.bf16.msra.mxu0 0
  %3139 = vmatprep.mubr.bf16.mxu0 0
  %3140 = vmatmul.mubr.bf16.gmra.mrb[0].mxu0 %v3035
  %v3141 = vpop.f32.mrb[0].mxu0
  %v3142 = vadd.f32 0.0, %v3141
  %v3143 = vpop.f32.mrb[0].mxu0
  %v3144 = vpop.f32.mrb[0].mxu0
  %v3145 = vadd.f32 0.0, %v3144
  %v3146 = vpop.f32.mrb[0].mxu0
  %3147 = vmatprep.mubr.bf16.mxu0 0
  %3148 = vmatmul.mubr.bf16.gmra.mrb[0].mxu0 %v3036
  %v3149 = vpop.f32.mrb[0].mxu0
  %v3150 = vadd.f32 0.0, %v3149
  %v3151 = vpop.f32.mrb[0].mxu0
  %v3152 = vpop.f32.mrb[0].mxu0
  %v3153 = vadd.f32 0.0, %v3152
  %v3154 = vpop.f32.mrb[0].mxu0
  %3155 = vmatprep.mubr.bf16.mxu0 0
  %3156 = vmatmul.mubr.bf16.gmra.mrb[0].mxu0 %v3037
  %v3157 = vpop.f32.mrb[0].mxu0
  %v3158 = vadd.f32 0.0, %v3157
  %v3159 = vpop.f32.mrb[0].mxu0
  %v3160 = vpop.f32.mrb[0].mxu0
  %v3161 = vadd.f32 0.0, %v3160
  %v3162 = vpop.f32.mrb[0].mxu0
  %3163 = vmatprep.mubr.bf16.mxu0 0
  %3164 = vmatmul.mubr.bf16.gmra.mrb[0].mxu0 %v3038
  %v3165 = vpop.f32.mrb[0].mxu0
  %v3166 = vadd.f32 0.0, %v3165
  %v3167 = vpop.f32.mrb[0].mxu0
  %v3168 = vpop.f32.mrb[0].mxu0
  %v3169 = vadd.f32 0.0, %v3168
  %v3170 = vpop.f32.mrb[0].mxu0
  %3171 = vmatprep.mubr.bf16.mxu0 0
  %3172 = vmatmul.mubr.bf16.gmra.mrb[0].mxu0 %v3039
  %v3173 = vpop.f32.mrb[0].mxu0
  %v3174 = vadd.f32 0.0, %v3173
  %v3175 = vpop.f32.mrb[0].mxu0
  %v3176 = vpop.f32.mrb[0].mxu0
  %v3177 = vadd.f32 0.0, %v3176
  %v3178 = vpop.f32.mrb[0].mxu0
  %3179 = vmatprep.mubr.bf16.mxu0 0
  %3180 = vmatmul.mubr.bf16.gmra.mrb[0].mxu0 %v3040
  %v3181 = vpop.f32.mrb[0].mxu0
  %v3182 = vadd.f32 0.0, %v3181
  %v3183 = vpop.f32.mrb[0].mxu0
  %v3184 = vpop.f32.mrb[0].mxu0
  %v3185 = vadd.f32 0.0, %v3184
  %v3186 = vpop.f32.mrb[0].mxu0
  %3187 = vmatprep.mubr.bf16.mxu0 0
  %3188 = vmatmul.mubr.bf16.gmra.mrb[0].mxu0 %v3041
  %v3189 = vpop.f32.mrb[0].mxu0
  %v3190 = vadd.f32 0.0, %v3189
  %v3191 = vpop.f32.mrb[0].mxu0
  %v3192 = vpop.f32.mrb[0].mxu0
  %v3193 = vpop.f32.mrb[0].mxu0
  %3194 = vdwg.mxu0
  %v3195 = vadd.f32 %v2671, %v3142
  %v3196 = vadd.f32 %v2672, %v3145
  %v3197 = vadd.f32 %v2673, %v3150
  %v3198 = vadd.f32 %v2674, %v3153
  %v3199 = vadd.f32 %v2675, %v3158
  %v3200 = vadd.f32 %v2676, %v3161
  %v3201 = vadd.f32 %v2677, %v3166
  %v3202 = vadd.f32 %v2678, %v3169
  %v3203 = vadd.f32 %v2679, %v3174
  %v3204 = vadd.f32 %v2680, %v3177
  %v3205 = vadd.f32 %v2681, %v3182
  %v3206 = vadd.f32 %v2682, %v3185
  %v3207 = vadd.f32 %v2683, %v3190
  %s3208 = scalar_lea.vmem %s3, 1040
  %v3209 = vld [vmem:[%s3208] sm:$0xff]
  %v3210 = vld [vmem:[%s3208 + $0x8] sm:$0xff]
  %v3211 = vld [vmem:[%s3208 + $0x10] sm:$0xff]
  %v3212 = vld [vmem:[%s3208 + $0x18] sm:$0xff]
  %v3213 = vld [vmem:[%s3208 + $0x20] sm:$0xff]
  %v3214 = vld [vmem:[%s3208 + $0x28] sm:$0xff]
  %v3215 = vld [vmem:[%s3208 + $0x30] sm:$0xff]
  %v3216 = vld [vmem:[%s3208 + $0x38] sm:$0xff]
  %v3217 = vld [vmem:[%s3208 + $0x40] sm:$0xff]
  %v3218 = vld [vmem:[%s3208 + $0x48] sm:$0xff]
  %v3219 = vld [vmem:[%s3208 + $0x50] sm:$0xff]
  %v3220 = vld [vmem:[%s3208 + $0x58] sm:$0xff]
  %v3221 = vld [vmem:[%s3208 + $0x60] sm:$0xff]
  %v3222 = vld [vmem:[%s3208 + $0x68] sm:$0xff]
  %v3223 = vld [vmem:[%s3208 + $0x70] sm:$0xff]
  %v3224 = vld [vmem:[%s3208 + $0x78] sm:$0xff]
  %v3225 = vld [vmem:[%s3208 + $0x80] sm:$0xff]
  %v3226 = vld [vmem:[%s3208 + $0x88] sm:$0xff]
  %v3227 = vld [vmem:[%s3208 + $0x90] sm:$0xff]
  %v3228 = vld [vmem:[%s3208 + $0x98] sm:$0xff]
  %v3229 = vld [vmem:[%s3208 + $0xa0] sm:$0xff]
  %v3230 = vld [vmem:[%s3208 + $0xa8] sm:$0xff]
  %v3231 = vld [vmem:[%s3208 + $0xb0] sm:$0xff]
  %v3232 = vld [vmem:[%s3208 + $0xb8] sm:$0xff]
  %v3233 = vld [vmem:[%s3208 + $0xc0] sm:$0xff]
  %v3234 = vld [vmem:[%s3208 + $0xc8] sm:$0xff]
  %v3261 = vunpack.c.l.b16 %v3209
  %v3262 = vunpack.c.h.b16 %v3209
  %v3263 = vunpack.c.l.b16 %v3210
  %v3264 = vunpack.c.h.b16 %v3210
  %v3265 = vunpack.c.l.b16 %v3211
  %v3266 = vunpack.c.h.b16 %v3211
  %v3267 = vunpack.c.l.b16 %v3212
  %v3268 = vunpack.c.h.b16 %v3212
  %v3269 = vunpack.c.l.b16 %v3213
  %v3270 = vunpack.c.h.b16 %v3213
  %v3271 = vunpack.c.l.b16 %v3214
  %v3272 = vunpack.c.h.b16 %v3214
  %v3273 = vunpack.c.l.b16 %v3215
  %v3274 = vunpack.c.h.b16 %v3215
  %v3275 = vunpack.c.l.b16 %v3216
  %v3276 = vunpack.c.h.b16 %v3216
  %v3277 = vunpack.c.l.b16 %v3217
  %v3278 = vunpack.c.h.b16 %v3217
  %v3279 = vunpack.c.l.b16 %v3218
  %v3280 = vunpack.c.h.b16 %v3218
  %v3281 = vunpack.c.l.b16 %v3219
  %v3282 = vunpack.c.h.b16 %v3219
  %v3283 = vunpack.c.l.b16 %v3220
  %v3284 = vunpack.c.h.b16 %v3220
  %v3285 = vunpack.c.l.b16 %v3221
  %v3286 = vunpack.c.h.b16 %v3221
  %v3287 = vunpack.c.l.b16 %v3222
  %v3288 = vunpack.c.h.b16 %v3222
  %v3289 = vunpack.c.l.b16 %v3223
  %v3290 = vunpack.c.h.b16 %v3223
  %v3291 = vunpack.c.l.b16 %v3224
  %v3292 = vunpack.c.h.b16 %v3224
  %v3293 = vunpack.c.l.b16 %v3225
  %v3294 = vunpack.c.h.b16 %v3225
  %v3295 = vunpack.c.l.b16 %v3226
  %v3296 = vunpack.c.h.b16 %v3226
  %v3297 = vunpack.c.l.b16 %v3227
  %v3298 = vunpack.c.h.b16 %v3227
  %v3299 = vunpack.c.l.b16 %v3228
  %v3300 = vunpack.c.h.b16 %v3228
  %v3301 = vunpack.c.l.b16 %v3229
  %v3302 = vunpack.c.h.b16 %v3229
  %v3303 = vunpack.c.l.b16 %v3230
  %v3304 = vunpack.c.h.b16 %v3230
  %v3305 = vunpack.c.l.b16 %v3231
  %v3306 = vunpack.c.h.b16 %v3231
  %v3307 = vunpack.c.l.b16 %v3232
  %v3308 = vunpack.c.h.b16 %v3232
  %v3309 = vunpack.c.l.b16 %v3233
  %v3310 = vunpack.c.h.b16 %v3233
  %v3311 = vunpack.c.l.b16 %v3234
  %v3312 = vunpack.c.h.b16 %v3234
  %v3313 = vpack.c.b16 %v3265, %v3261
  %v3314 = vpack.c.b16 %v3266, %v3262
  %v3315 = vpack.c.b16 %v3267, %v3263
  %v3316 = vpack.c.b16 %v3268, %v3264
  %v3317 = vpack.c.b16 %v3273, %v3269
  %v3318 = vpack.c.b16 %v3274, %v3270
  %v3319 = vpack.c.b16 %v3275, %v3271
  %v3320 = vpack.c.b16 %v3276, %v3272
  %v3321 = vpack.c.b16 %v3281, %v3277
  %v3322 = vpack.c.b16 %v3282, %v3278
  %v3323 = vpack.c.b16 %v3283, %v3279
  %v3324 = vpack.c.b16 %v3284, %v3280
  %v3325 = vpack.c.b16 %v3289, %v3285
  %v3326 = vpack.c.b16 %v3290, %v3286
  %v3327 = vpack.c.b16 %v3291, %v3287
  %v3328 = vpack.c.b16 %v3292, %v3288
  %v3329 = vpack.c.b16 %v3297, %v3293
  %v3330 = vpack.c.b16 %v3298, %v3294
  %v3331 = vpack.c.b16 %v3299, %v3295
  %v3332 = vpack.c.b16 %v3300, %v3296
  %v3333 = vpack.c.b16 %v3305, %v3301
  %v3334 = vpack.c.b16 %v3306, %v3302
  %v3335 = vpack.c.b16 %v3307, %v3303
  %v3336 = vpack.c.b16 %v3308, %v3304
  %v3337 = vpack.c.b16 %v3309, %v3309
  %v3338 = vpack.c.b16 %v3310, %v3310
  %v3339 = vpack.c.b16 %v3311, %v3311
  %v3340 = vpack.c.b16 %v3312, %v3312
  %v3363 = vsel %vm764, %v3316, 0
  %v3366 = vsel %vm764, %v3320, 0
  %v3369 = vsel %vm764, %v3324, 0
  %v3372 = vsel %vm764, %v3328, 0
  %v3375 = vsel %vm764, %v3332, 0
  %v3378 = vsel %vm764, %v3336, 0
  %v3381 = vsel %vm764, %v3340, 0
  %3383 = vmatprep.subr.bf16.mxu0 0
  %3384 = vmatpush1.bf16.msra.mxu0 %v586
  %3385 = vmatprep.subr.bf16.mxu0 0
  %3386 = vmatpush1.bf16.msra.mxu0 %v587
  %3387 = vmatprep.subr.bf16.mxu0 0
  %3388 = vmatpush1.bf16.msra.mxu0 %v588
  %3389 = vmatprep.subr.bf16.mxu0 0
  %3390 = vmatpush1.bf16.msra.mxu0 %v589
  %3391 = vmatprep.subr.bf16.mxu0 0
  %3392 = vmatpush1.bf16.msra.mxu0 %v590
  %3393 = vmatprep.subr.bf16.mxu0 0
  %3394 = vmatpush1.bf16.msra.mxu0 %v591
  %3395 = vmatprep.subr.bf16.mxu0 0
  %3396 = vmatpush1.bf16.msra.mxu0 %v592
  %3397 = vmatprep.subr.bf16.mxu0 0
  %3398 = vmatpush1.bf16.msra.mxu0 %v593
  %3399 = vmatprep.subr.bf16.mxu0 0
  %3400 = vmatpush1.bf16.msra.mxu0 %v594
  %3401 = vmatprep.subr.bf16.mxu0 0
  %3402 = vmatpush1.bf16.msra.mxu0 %v595
  %3403 = vmatprep.subr.bf16.mxu0 0
  %3404 = vmatpush1.bf16.msra.mxu0 %v596
  %3405 = vmatprep.subr.bf16.mxu0 0
  %3406 = vmatpush1.bf16.msra.mxu0 %v597
  %3407 = vmatprep.subr.bf16.mxu0 0
  %3408 = vmatpush1.bf16.msra.mxu0 %v598
  %3409 = vmatprep.subr.bf16.mxu0 0
  %3410 = vmatpush1.bf16.msra.mxu0 %v599
  %3411 = vmatprep.subr.bf16.mxu0 0
  %3412 = vmatpush1.bf16.msra.mxu0 %v600
  %3413 = vmatprep.subr.bf16.mxu0 0
  %3414 = vmatpush1.bf16.msra.mxu0 %v601
  %3415 = vmatprep.mubr.bf16.mxu0 %v3314
  %3416 = vmatmul.mubr.bf16.gmra.mrb[0].mxu0 %v3313
  %v3417 = vpop.f32.mrb[0].mxu0
  %v3418 = vadd.f32 0.0, %v3417
  %v3419 = vpop.f32.mrb[0].mxu0
  %v3420 = vpop.f32.mrb[0].mxu0
  %v3421 = vadd.f32 0.0, %v3420
  %v3422 = vpop.f32.mrb[0].mxu0
  %3423 = vmatprep.mubr.bf16.mxu0 %v3318
  %3424 = vmatmul.mubr.bf16.gmra.mrb[0].mxu0 %v3317
  %v3425 = vpop.f32.mrb[0].mxu0
  %v3426 = vadd.f32 0.0, %v3425
  %v3427 = vpop.f32.mrb[0].mxu0
  %v3428 = vpop.f32.mrb[0].mxu0
  %v3429 = vadd.f32 0.0, %v3428
  %v3430 = vpop.f32.mrb[0].mxu0
  %3431 = vmatprep.mubr.bf16.mxu0 %v3322
  %3432 = vmatmul.mubr.bf16.gmra.mrb[0].mxu0 %v3321
  %v3433 = vpop.f32.mrb[0].mxu0
  %v3434 = vadd.f32 0.0, %v3433
  %v3435 = vpop.f32.mrb[0].mxu0
  %v3436 = vpop.f32.mrb[0].mxu0
  %v3437 = vadd.f32 0.0, %v3436
  %v3438 = vpop.f32.mrb[0].mxu0
  %3439 = vmatprep.mubr.bf16.mxu0 %v3326
  %3440 = vmatmul.mubr.bf16.gmra.mrb[0].mxu0 %v3325
  %v3441 = vpop.f32.mrb[0].mxu0
  %v3442 = vadd.f32 0.0, %v3441
  %v3443 = vpop.f32.mrb[0].mxu0
  %v3444 = vpop.f32.mrb[0].mxu0
  %v3445 = vadd.f32 0.0, %v3444
  %v3446 = vpop.f32.mrb[0].mxu0
  %3447 = vmatprep.mubr.bf16.mxu0 %v3330
  %3448 = vmatmul.mubr.bf16.gmra.mrb[0].mxu0 %v3329
  %v3449 = vpop.f32.mrb[0].mxu0
  %v3450 = vadd.f32 0.0, %v3449
  %v3451 = vpop.f32.mrb[0].mxu0
  %v3452 = vpop.f32.mrb[0].mxu0
  %v3453 = vadd.f32 0.0, %v3452
  %v3454 = vpop.f32.mrb[0].mxu0
  %3455 = vmatprep.mubr.bf16.mxu0 %v3334
  %3456 = vmatmul.mubr.bf16.gmra.mrb[0].mxu0 %v3333
  %v3457 = vpop.f32.mrb[0].mxu0
  %v3458 = vadd.f32 0.0, %v3457
  %v3459 = vpop.f32.mrb[0].mxu0
  %v3460 = vpop.f32.mrb[0].mxu0
  %v3461 = vadd.f32 0.0, %v3460
  %v3462 = vpop.f32.mrb[0].mxu0
  %3463 = vmatprep.mubr.bf16.mxu0 %v3338
  %3464 = vmatmul.mubr.bf16.gmra.mrb[0].mxu0 %v3337
  %v3465 = vpop.f32.mrb[0].mxu0
  %v3466 = vadd.f32 0.0, %v3465
  %v3467 = vpop.f32.mrb[0].mxu0
  %v3468 = vpop.f32.mrb[0].mxu0
  %v3469 = vpop.f32.mrb[0].mxu0
  %3470 = vdwg.mxu0
  %3471 = vmatprep.subr.bf16.mxu0 0
  %3472 = vmatpush1.bf16.msra.mxu0 %v602
  %3473 = vmatprep.subr.bf16.mxu0 0
  %3474 = vmatpush1.bf16.msra.mxu0 %v603
  %3475 = vmatprep.subr.bf16.mxu0 0
  %3476 = vmatpush1.bf16.msra.mxu0 %v604
  %3477 = vmatprep.subr.bf16.mxu0 0
  %3478 = vmatpush1.bf16.msra.mxu0 %v605
  %3479 = vmatprep.subr.bf16.mxu0 0
  %3480 = vmatpush1.bf16.msra.mxu0 %v606
  %3481 = vmatprep.subr.bf16.mxu0 0
  %3482 = vmatpush1.bf16.msra.mxu0 %v607
  %3483 = vmatprep.subr.bf16.mxu0 0
  %3484 = vmatpush1.bf16.msra.mxu0 %v608
  %3485 = vmatprep.subr.bf16.mxu0 0
  %3486 = vmatpush1.bf16.msra.mxu0 %v609
  %3487 = vmatprep.subr.bf16.mxu0 0
  %3488 = vmatpush1.bf16.msra.mxu0 %v788
  %3489 = vmatprep.subr.bf16.mxu0 0
  %3490 = vmatpush1.bf16.msra.mxu0 0
  %3491 = vmatprep.subr.bf16.mxu0 0
  %3492 = vmatpush1.bf16.msra.mxu0 0
  %3493 = vmatprep.subr.bf16.mxu0 0
  %3494 = vmatpush1.bf16.msra.mxu0 0
  %3495 = vmatprep.subr.bf16.mxu0 0
  %3496 = vmatpush1.bf16.msra.mxu0 0
  %3497 = vmatprep.subr.bf16.mxu0 0
  %3498 = vmatpush1.bf16.msra.mxu0 0
  %3499 = vmatprep.subr.bf16.mxu0 0
  %3500 = vmatpush1.bf16.msra.mxu0 0
  %3501 = vmatprep.subr.bf16.mxu0 0
  %3502 = vmatpush1.bf16.msra.mxu0 0
  %3503 = vmatprep.mubr.bf16.mxu0 %v3363
  %3504 = vmatmul.mubr.bf16.gmra.mrb[0].mxu0 %v3315
  %v3505 = vpop.f32.mrb[0].mxu0
  %v3506 = vadd.f32 %v3418, %v3505
  %v3507 = vpop.f32.mrb[0].mxu0
  %v3508 = vpop.f32.mrb[0].mxu0
  %v3509 = vadd.f32 %v3421, %v3508
  %v3510 = vpop.f32.mrb[0].mxu0
  %3511 = vmatprep.mubr.bf16.mxu0 %v3366
  %3512 = vmatmul.mubr.bf16.gmra.mrb[0].mxu0 %v3319
  %v3513 = vpop.f32.mrb[0].mxu0
  %v3514 = vadd.f32 %v3426, %v3513
  %v3515 = vpop.f32.mrb[0].mxu0
  %v3516 = vpop.f32.mrb[0].mxu0
  %v3517 = vadd.f32 %v3429, %v3516
  %v3518 = vpop.f32.mrb[0].mxu0
  %3519 = vmatprep.mubr.bf16.mxu0 %v3369
  %3520 = vmatmul.mubr.bf16.gmra.mrb[0].mxu0 %v3323
  %v3521 = vpop.f32.mrb[0].mxu0
  %v3522 = vadd.f32 %v3434, %v3521
  %v3523 = vpop.f32.mrb[0].mxu0
  %v3524 = vpop.f32.mrb[0].mxu0
  %v3525 = vadd.f32 %v3437, %v3524
  %v3526 = vpop.f32.mrb[0].mxu0
  %3527 = vmatprep.mubr.bf16.mxu0 %v3372
  %3528 = vmatmul.mubr.bf16.gmra.mrb[0].mxu0 %v3327
  %v3529 = vpop.f32.mrb[0].mxu0
  %v3530 = vadd.f32 %v3442, %v3529
  %v3531 = vpop.f32.mrb[0].mxu0
  %v3532 = vpop.f32.mrb[0].mxu0
  %v3533 = vadd.f32 %v3445, %v3532
  %v3534 = vpop.f32.mrb[0].mxu0
  %3535 = vmatprep.mubr.bf16.mxu0 %v3375
  %3536 = vmatmul.mubr.bf16.gmra.mrb[0].mxu0 %v3331
  %v3537 = vpop.f32.mrb[0].mxu0
  %v3538 = vadd.f32 %v3450, %v3537
  %v3539 = vpop.f32.mrb[0].mxu0
  %v3540 = vpop.f32.mrb[0].mxu0
  %v3541 = vadd.f32 %v3453, %v3540
  %v3542 = vpop.f32.mrb[0].mxu0
  %3543 = vmatprep.mubr.bf16.mxu0 %v3378
  %3544 = vmatmul.mubr.bf16.gmra.mrb[0].mxu0 %v3335
  %v3545 = vpop.f32.mrb[0].mxu0
  %v3546 = vadd.f32 %v3458, %v3545
  %v3547 = vpop.f32.mrb[0].mxu0
  %v3548 = vpop.f32.mrb[0].mxu0
  %v3549 = vadd.f32 %v3461, %v3548
  %v3550 = vpop.f32.mrb[0].mxu0
  %3551 = vmatprep.mubr.bf16.mxu0 %v3381
  %3552 = vmatmul.mubr.bf16.gmra.mrb[0].mxu0 %v3339
  %v3553 = vpop.f32.mrb[0].mxu0
  %v3554 = vadd.f32 %v3466, %v3553
  %v3555 = vpop.f32.mrb[0].mxu0
  %v3556 = vpop.f32.mrb[0].mxu0
  %v3557 = vpop.f32.mrb[0].mxu0
  %3558 = vdwg.mxu0
  %v3559 = vpack.c.bf16 %v3509, %v3506
  %v3560 = vpack.c.bf16 %v3517, %v3514
  %v3561 = vpack.c.bf16 %v3525, %v3522
  %v3562 = vpack.c.bf16 %v3533, %v3530
  %v3563 = vpack.c.bf16 %v3541, %v3538
  %v3564 = vpack.c.bf16 %v3549, %v3546
  %v3565 = vpack.c.bf16 %v3554, %v3554
  %s3566 = scalar_lea.vmem %s4, 320
  %v3567 = vld [vmem:[%s3566] sm:$0xf]
  %v3568 = vld [vmem:[%s3566 + $0x4] sm:$0xf]
  %v3569 = vld [vmem:[%s3566 + $0x8] sm:$0xf]
  %v3570 = vld [vmem:[%s3566 + $0xc] sm:$0xf]
  %v3571 = vld [vmem:[%s3566 + $0x10] sm:$0xf]
  %v3572 = vld [vmem:[%s3566 + $0x14] sm:$0xf]
  %v3573 = vld [vmem:[%s3566 + $0x18] sm:$0xf]
  %v3574 = vld [vmem:[%s3566 + $0x1c] sm:$0xf]
  %v3575 = vld [vmem:[%s3566 + $0x20] sm:$0xf]
  %v3576 = vld [vmem:[%s3566 + $0x24] sm:$0xf]
  %v3577 = vld [vmem:[%s3566 + $0x28] sm:$0xf]
  %v3578 = vld [vmem:[%s3566 + $0x2c] sm:$0xf]
  %v3579 = vld [vmem:[%s3566 + $0x30] sm:$0xf]
  %v3580 = vld [vmem:[%s3566 + $0x34] sm:$0xf]
  %v3581 = vld [vmem:[%s3566 + $0x38] sm:$0xf]
  %v3582 = vld [vmem:[%s3566 + $0x3c] sm:$0xf]
  %v3599 = vunpack.c.l.b16 %v3567
  %v3600 = vunpack.c.l.b16 %v3568
  %v3601 = vunpack.c.l.b16 %v3569
  %v3602 = vunpack.c.l.b16 %v3570
  %v3603 = vunpack.c.l.b16 %v3571
  %v3604 = vunpack.c.l.b16 %v3572
  %v3605 = vunpack.c.l.b16 %v3573
  %v3606 = vunpack.c.l.b16 %v3574
  %v3607 = vunpack.c.l.b16 %v3575
  %v3608 = vunpack.c.l.b16 %v3576
  %v3609 = vunpack.c.l.b16 %v3577
  %v3610 = vunpack.c.l.b16 %v3578
  %v3611 = vunpack.c.l.b16 %v3579
  %v3612 = vunpack.c.l.b16 %v3580
  %v3613 = vunpack.c.l.b16 %v3581
  %v3614 = vunpack.c.l.b16 %v3582
  %v3615 = vpack.c.b16 %v3600, %v3599
  %v3616 = vpack.c.b16 %v3602, %v3601
  %v3617 = vpack.c.b16 %v3604, %v3603
  %v3618 = vpack.c.b16 %v3606, %v3605
  %v3619 = vpack.c.b16 %v3608, %v3607
  %v3620 = vpack.c.b16 %v3610, %v3609
  %v3621 = vpack.c.b16 %v3612, %v3611
  %v3622 = vpack.c.b16 %v3614, %v3613
  %3631 = vmatprep.subr.bf16.mxu0 0
  %3632 = vmatpush1.bf16.msra.mxu0 %v3615
  %3633 = vmatprep.subr.bf16.mxu0 0
  %3634 = vmatpush1.bf16.msra.mxu0 %v3616
  %3635 = vmatprep.subr.bf16.mxu0 0
  %3636 = vmatpush1.bf16.msra.mxu0 %v3617
  %3637 = vmatprep.subr.bf16.mxu0 0
  %3638 = vmatpush1.bf16.msra.mxu0 %v3618
  %3639 = vmatprep.subr.bf16.mxu0 0
  %3640 = vmatpush1.bf16.msra.mxu0 %v3619
  %3641 = vmatprep.subr.bf16.mxu0 0
  %3642 = vmatpush1.bf16.msra.mxu0 %v3620
  %3643 = vmatprep.subr.bf16.mxu0 0
  %3644 = vmatpush1.bf16.msra.mxu0 %v3621
  %3645 = vmatprep.subr.bf16.mxu0 0
  %3646 = vmatpush1.bf16.msra.mxu0 %v3622
  %3647 = vmatprep.subr.bf16.mxu0 0
  %3648 = vmatpush1.bf16.msra.mxu0 0
  %3649 = vmatprep.subr.bf16.mxu0 0
  %3650 = vmatpush1.bf16.msra.mxu0 0
  %3651 = vmatprep.subr.bf16.mxu0 0
  %3652 = vmatpush1.bf16.msra.mxu0 0
  %3653 = vmatprep.subr.bf16.mxu0 0
  %3654 = vmatpush1.bf16.msra.mxu0 0
  %3655 = vmatprep.subr.bf16.mxu0 0
  %3656 = vmatpush1.bf16.msra.mxu0 0
  %3657 = vmatprep.subr.bf16.mxu0 0
  %3658 = vmatpush1.bf16.msra.mxu0 0
  %3659 = vmatprep.subr.bf16.mxu0 0
  %3660 = vmatpush1.bf16.msra.mxu0 0
  %3661 = vmatprep.subr.bf16.mxu0 0
  %3662 = vmatpush1.bf16.msra.mxu0 0
  %3663 = vmatprep.mubr.bf16.mxu0 0
  %3664 = vmatmul.mubr.bf16.gmra.mrb[0].mxu0 %v3559
  %v3665 = vpop.f32.mrb[0].mxu0
  %v3666 = vadd.f32 0.0, %v3665
  %v3667 = vpop.f32.mrb[0].mxu0
  %v3668 = vpop.f32.mrb[0].mxu0
  %v3669 = vadd.f32 0.0, %v3668
  %v3670 = vpop.f32.mrb[0].mxu0
  %3671 = vmatprep.mubr.bf16.mxu0 0
  %3672 = vmatmul.mubr.bf16.gmra.mrb[0].mxu0 %v3560
  %v3673 = vpop.f32.mrb[0].mxu0
  %v3674 = vadd.f32 0.0, %v3673
  %v3675 = vpop.f32.mrb[0].mxu0
  %v3676 = vpop.f32.mrb[0].mxu0
  %v3677 = vadd.f32 0.0, %v3676
  %v3678 = vpop.f32.mrb[0].mxu0
  %3679 = vmatprep.mubr.bf16.mxu0 0
  %3680 = vmatmul.mubr.bf16.gmra.mrb[0].mxu0 %v3561
  %v3681 = vpop.f32.mrb[0].mxu0
  %v3682 = vadd.f32 0.0, %v3681
  %v3683 = vpop.f32.mrb[0].mxu0
  %v3684 = vpop.f32.mrb[0].mxu0
  %v3685 = vadd.f32 0.0, %v3684
  %v3686 = vpop.f32.mrb[0].mxu0
  %3687 = vmatprep.mubr.bf16.mxu0 0
  %3688 = vmatmul.mubr.bf16.gmra.mrb[0].mxu0 %v3562
  %v3689 = vpop.f32.mrb[0].mxu0
  %v3690 = vadd.f32 0.0, %v3689
  %v3691 = vpop.f32.mrb[0].mxu0
  %v3692 = vpop.f32.mrb[0].mxu0
  %v3693 = vadd.f32 0.0, %v3692
  %v3694 = vpop.f32.mrb[0].mxu0
  %3695 = vmatprep.mubr.bf16.mxu0 0
  %3696 = vmatmul.mubr.bf16.gmra.mrb[0].mxu0 %v3563
  %v3697 = vpop.f32.mrb[0].mxu0
  %v3698 = vadd.f32 0.0, %v3697
  %v3699 = vpop.f32.mrb[0].mxu0
  %v3700 = vpop.f32.mrb[0].mxu0
  %v3701 = vadd.f32 0.0, %v3700
  %v3702 = vpop.f32.mrb[0].mxu0
  %3703 = vmatprep.mubr.bf16.mxu0 0
  %3704 = vmatmul.mubr.bf16.gmra.mrb[0].mxu0 %v3564
  %v3705 = vpop.f32.mrb[0].mxu0
  %v3706 = vadd.f32 0.0, %v3705
  %v3707 = vpop.f32.mrb[0].mxu0
  %v3708 = vpop.f32.mrb[0].mxu0
  %v3709 = vadd.f32 0.0, %v3708
  %v3710 = vpop.f32.mrb[0].mxu0
  %3711 = vmatprep.mubr.bf16.mxu0 0
  %3712 = vmatmul.mubr.bf16.gmra.mrb[0].mxu0 %v3565
  %v3713 = vpop.f32.mrb[0].mxu0
  %v3714 = vadd.f32 0.0, %v3713
  %v3715 = vpop.f32.mrb[0].mxu0
  %v3716 = vpop.f32.mrb[0].mxu0
  %v3717 = vpop.f32.mrb[0].mxu0
  %3718 = vdwg.mxu0
  %v3719 = vadd.f32 %v3195, %v3666
  %v3720 = vadd.f32 %v3196, %v3669
  %v3721 = vadd.f32 %v3197, %v3674
  %v3722 = vadd.f32 %v3198, %v3677
  %v3723 = vadd.f32 %v3199, %v3682
  %v3724 = vadd.f32 %v3200, %v3685
  %v3725 = vadd.f32 %v3201, %v3690
  %v3726 = vadd.f32 %v3202, %v3693
  %v3727 = vadd.f32 %v3203, %v3698
  %v3728 = vadd.f32 %v3204, %v3701
  %v3729 = vadd.f32 %v3205, %v3706
  %v3730 = vadd.f32 %v3206, %v3709
  %v3731 = vadd.f32 %v3207, %v3714
  %s3732 = scalar_lea.vmem %s3, 1248
  %v3733 = vld [vmem:[%s3732] sm:$0xff]
  %v3734 = vld [vmem:[%s3732 + $0x8] sm:$0xff]
  %v3735 = vld [vmem:[%s3732 + $0x10] sm:$0xff]
  %v3736 = vld [vmem:[%s3732 + $0x18] sm:$0xff]
  %v3737 = vld [vmem:[%s3732 + $0x20] sm:$0xff]
  %v3738 = vld [vmem:[%s3732 + $0x28] sm:$0xff]
  %v3739 = vld [vmem:[%s3732 + $0x30] sm:$0xff]
  %v3740 = vld [vmem:[%s3732 + $0x38] sm:$0xff]
  %v3741 = vld [vmem:[%s3732 + $0x40] sm:$0xff]
  %v3742 = vld [vmem:[%s3732 + $0x48] sm:$0xff]
  %v3743 = vld [vmem:[%s3732 + $0x50] sm:$0xff]
  %v3744 = vld [vmem:[%s3732 + $0x58] sm:$0xff]
  %v3745 = vld [vmem:[%s3732 + $0x60] sm:$0xff]
  %v3746 = vld [vmem:[%s3732 + $0x68] sm:$0xff]
  %v3747 = vld [vmem:[%s3732 + $0x70] sm:$0xff]
  %v3748 = vld [vmem:[%s3732 + $0x78] sm:$0xff]
  %v3749 = vld [vmem:[%s3732 + $0x80] sm:$0xff]
  %v3750 = vld [vmem:[%s3732 + $0x88] sm:$0xff]
  %v3751 = vld [vmem:[%s3732 + $0x90] sm:$0xff]
  %v3752 = vld [vmem:[%s3732 + $0x98] sm:$0xff]
  %v3753 = vld [vmem:[%s3732 + $0xa0] sm:$0xff]
  %v3754 = vld [vmem:[%s3732 + $0xa8] sm:$0xff]
  %v3755 = vld [vmem:[%s3732 + $0xb0] sm:$0xff]
  %v3756 = vld [vmem:[%s3732 + $0xb8] sm:$0xff]
  %v3757 = vld [vmem:[%s3732 + $0xc0] sm:$0xff]
  %v3758 = vld [vmem:[%s3732 + $0xc8] sm:$0xff]
  %v3785 = vunpack.c.l.b16 %v3733
  %v3786 = vunpack.c.h.b16 %v3733
  %v3787 = vunpack.c.l.b16 %v3734
  %v3788 = vunpack.c.h.b16 %v3734
  %v3789 = vunpack.c.l.b16 %v3735
  %v3790 = vunpack.c.h.b16 %v3735
  %v3791 = vunpack.c.l.b16 %v3736
  %v3792 = vunpack.c.h.b16 %v3736
  %v3793 = vunpack.c.l.b16 %v3737
  %v3794 = vunpack.c.h.b16 %v3737
  %v3795 = vunpack.c.l.b16 %v3738
  %v3796 = vunpack.c.h.b16 %v3738
  %v3797 = vunpack.c.l.b16 %v3739
  %v3798 = vunpack.c.h.b16 %v3739
  %v3799 = vunpack.c.l.b16 %v3740
  %v3800 = vunpack.c.h.b16 %v3740
  %v3801 = vunpack.c.l.b16 %v3741
  %v3802 = vunpack.c.h.b16 %v3741
  %v3803 = vunpack.c.l.b16 %v3742
  %v3804 = vunpack.c.h.b16 %v3742
  %v3805 = vunpack.c.l.b16 %v3743
  %v3806 = vunpack.c.h.b16 %v3743
  %v3807 = vunpack.c.l.b16 %v3744
  %v3808 = vunpack.c.h.b16 %v3744
  %v3809 = vunpack.c.l.b16 %v3745
  %v3810 = vunpack.c.h.b16 %v3745
  %v3811 = vunpack.c.l.b16 %v3746
  %v3812 = vunpack.c.h.b16 %v3746
  %v3813 = vunpack.c.l.b16 %v3747
  %v3814 = vunpack.c.h.b16 %v3747
  %v3815 = vunpack.c.l.b16 %v3748
  %v3816 = vunpack.c.h.b16 %v3748
  %v3817 = vunpack.c.l.b16 %v3749
  %v3818 = vunpack.c.h.b16 %v3749
  %v3819 = vunpack.c.l.b16 %v3750
  %v3820 = vunpack.c.h.b16 %v3750
  %v3821 = vunpack.c.l.b16 %v3751
  %v3822 = vunpack.c.h.b16 %v3751
  %v3823 = vunpack.c.l.b16 %v3752
  %v3824 = vunpack.c.h.b16 %v3752
  %v3825 = vunpack.c.l.b16 %v3753
  %v3826 = vunpack.c.h.b16 %v3753
  %v3827 = vunpack.c.l.b16 %v3754
  %v3828 = vunpack.c.h.b16 %v3754
  %v3829 = vunpack.c.l.b16 %v3755
  %v3830 = vunpack.c.h.b16 %v3755
  %v3831 = vunpack.c.l.b16 %v3756
  %v3832 = vunpack.c.h.b16 %v3756
  %v3833 = vunpack.c.l.b16 %v3757
  %v3834 = vunpack.c.h.b16 %v3757
  %v3835 = vunpack.c.l.b16 %v3758
  %v3836 = vunpack.c.h.b16 %v3758
  %v3837 = vpack.c.b16 %v3789, %v3785
  %v3838 = vpack.c.b16 %v3790, %v3786
  %v3839 = vpack.c.b16 %v3791, %v3787
  %v3840 = vpack.c.b16 %v3792, %v3788
  %v3841 = vpack.c.b16 %v3797, %v3793
  %v3842 = vpack.c.b16 %v3798, %v3794
  %v3843 = vpack.c.b16 %v3799, %v3795
  %v3844 = vpack.c.b16 %v3800, %v3796
  %v3845 = vpack.c.b16 %v3805, %v3801
  %v3846 = vpack.c.b16 %v3806, %v3802
  %v3847 = vpack.c.b16 %v3807, %v3803
  %v3848 = vpack.c.b16 %v3808, %v3804
  %v3849 = vpack.c.b16 %v3813, %v3809
  %v3850 = vpack.c.b16 %v3814, %v3810
  %v3851 = vpack.c.b16 %v3815, %v3811
  %v3852 = vpack.c.b16 %v3816, %v3812
  %v3853 = vpack.c.b16 %v3821, %v3817
  %v3854 = vpack.c.b16 %v3822, %v3818
  %v3855 = vpack.c.b16 %v3823, %v3819
  %v3856 = vpack.c.b16 %v3824, %v3820
  %v3857 = vpack.c.b16 %v3829, %v3825
  %v3858 = vpack.c.b16 %v3830, %v3826
  %v3859 = vpack.c.b16 %v3831, %v3827
  %v3860 = vpack.c.b16 %v3832, %v3828
  %v3861 = vpack.c.b16 %v3833, %v3833
  %v3862 = vpack.c.b16 %v3834, %v3834
  %v3863 = vpack.c.b16 %v3835, %v3835
  %v3864 = vpack.c.b16 %v3836, %v3836
  %v3887 = vsel %vm764, %v3840, 0
  %v3890 = vsel %vm764, %v3844, 0
  %v3893 = vsel %vm764, %v3848, 0
  %v3896 = vsel %vm764, %v3852, 0
  %v3899 = vsel %vm764, %v3856, 0
  %v3902 = vsel %vm764, %v3860, 0
  %v3905 = vsel %vm764, %v3864, 0
  %3907 = vmatprep.subr.bf16.mxu0 0
  %3908 = vmatpush1.bf16.msra.mxu0 %v586
  %3909 = vmatprep.subr.bf16.mxu0 0
  %3910 = vmatpush1.bf16.msra.mxu0 %v587
  %3911 = vmatprep.subr.bf16.mxu0 0
  %3912 = vmatpush1.bf16.msra.mxu0 %v588
  %3913 = vmatprep.subr.bf16.mxu0 0
  %3914 = vmatpush1.bf16.msra.mxu0 %v589
  %3915 = vmatprep.subr.bf16.mxu0 0
  %3916 = vmatpush1.bf16.msra.mxu0 %v590
  %3917 = vmatprep.subr.bf16.mxu0 0
  %3918 = vmatpush1.bf16.msra.mxu0 %v591
  %3919 = vmatprep.subr.bf16.mxu0 0
  %3920 = vmatpush1.bf16.msra.mxu0 %v592
  %3921 = vmatprep.subr.bf16.mxu0 0
  %3922 = vmatpush1.bf16.msra.mxu0 %v593
  %3923 = vmatprep.subr.bf16.mxu0 0
  %3924 = vmatpush1.bf16.msra.mxu0 %v594
  %3925 = vmatprep.subr.bf16.mxu0 0
  %3926 = vmatpush1.bf16.msra.mxu0 %v595
  %3927 = vmatprep.subr.bf16.mxu0 0
  %3928 = vmatpush1.bf16.msra.mxu0 %v596
  %3929 = vmatprep.subr.bf16.mxu0 0
  %3930 = vmatpush1.bf16.msra.mxu0 %v597
  %3931 = vmatprep.subr.bf16.mxu0 0
  %3932 = vmatpush1.bf16.msra.mxu0 %v598
  %3933 = vmatprep.subr.bf16.mxu0 0
  %3934 = vmatpush1.bf16.msra.mxu0 %v599
  %3935 = vmatprep.subr.bf16.mxu0 0
  %3936 = vmatpush1.bf16.msra.mxu0 %v600
  %3937 = vmatprep.subr.bf16.mxu0 0
  %3938 = vmatpush1.bf16.msra.mxu0 %v601
  %3939 = vmatprep.mubr.bf16.mxu0 %v3838
  %3940 = vmatmul.mubr.bf16.gmra.mrb[0].mxu0 %v3837
  %v3941 = vpop.f32.mrb[0].mxu0
  %v3942 = vadd.f32 0.0, %v3941
  %v3943 = vpop.f32.mrb[0].mxu0
  %v3944 = vpop.f32.mrb[0].mxu0
  %v3945 = vadd.f32 0.0, %v3944
  %v3946 = vpop.f32.mrb[0].mxu0
  %3947 = vmatprep.mubr.bf16.mxu0 %v3842
  %3948 = vmatmul.mubr.bf16.gmra.mrb[0].mxu0 %v3841
  %v3949 = vpop.f32.mrb[0].mxu0
  %v3950 = vadd.f32 0.0, %v3949
  %v3951 = vpop.f32.mrb[0].mxu0
  %v3952 = vpop.f32.mrb[0].mxu0
  %v3953 = vadd.f32 0.0, %v3952
  %v3954 = vpop.f32.mrb[0].mxu0
  %3955 = vmatprep.mubr.bf16.mxu0 %v3846
  %3956 = vmatmul.mubr.bf16.gmra.mrb[0].mxu0 %v3845
  %v3957 = vpop.f32.mrb[0].mxu0
  %v3958 = vadd.f32 0.0, %v3957
  %v3959 = vpop.f32.mrb[0].mxu0
  %v3960 = vpop.f32.mrb[0].mxu0
  %v3961 = vadd.f32 0.0, %v3960
  %v3962 = vpop.f32.mrb[0].mxu0
  %3963 = vmatprep.mubr.bf16.mxu0 %v3850
  %3964 = vmatmul.mubr.bf16.gmra.mrb[0].mxu0 %v3849
  %v3965 = vpop.f32.mrb[0].mxu0
  %v3966 = vadd.f32 0.0, %v3965
  %v3967 = vpop.f32.mrb[0].mxu0
  %v3968 = vpop.f32.mrb[0].mxu0
  %v3969 = vadd.f32 0.0, %v3968
  %v3970 = vpop.f32.mrb[0].mxu0
  %3971 = vmatprep.mubr.bf16.mxu0 %v3854
  %3972 = vmatmul.mubr.bf16.gmra.mrb[0].mxu0 %v3853
  %v3973 = vpop.f32.mrb[0].mxu0
  %v3974 = vadd.f32 0.0, %v3973
  %v3975 = vpop.f32.mrb[0].mxu0
  %v3976 = vpop.f32.mrb[0].mxu0
  %v3977 = vadd.f32 0.0, %v3976
  %v3978 = vpop.f32.mrb[0].mxu0
  %3979 = vmatprep.mubr.bf16.mxu0 %v3858
  %3980 = vmatmul.mubr.bf16.gmra.mrb[0].mxu0 %v3857
  %v3981 = vpop.f32.mrb[0].mxu0
  %v3982 = vadd.f32 0.0, %v3981
  %v3983 = vpop.f32.mrb[0].mxu0
  %v3984 = vpop.f32.mrb[0].mxu0
  %v3985 = vadd.f32 0.0, %v3984
  %v3986 = vpop.f32.mrb[0].mxu0
  %3987 = vmatprep.mubr.bf16.mxu0 %v3862
  %3988 = vmatmul.mubr.bf16.gmra.mrb[0].mxu0 %v3861
  %v3989 = vpop.f32.mrb[0].mxu0
  %v3990 = vadd.f32 0.0, %v3989
  %v3991 = vpop.f32.mrb[0].mxu0
  %v3992 = vpop.f32.mrb[0].mxu0
  %v3993 = vpop.f32.mrb[0].mxu0
  %3994 = vdwg.mxu0
  %3995 = vmatprep.subr.bf16.mxu0 0
  %3996 = vmatpush1.bf16.msra.mxu0 %v602
  %3997 = vmatprep.subr.bf16.mxu0 0
  %3998 = vmatpush1.bf16.msra.mxu0 %v603
  %3999 = vmatprep.subr.bf16.mxu0 0
  %4000 = vmatpush1.bf16.msra.mxu0 %v604
  %4001 = vmatprep.subr.bf16.mxu0 0
  %4002 = vmatpush1.bf16.msra.mxu0 %v605
  %4003 = vmatprep.subr.bf16.mxu0 0
  %4004 = vmatpush1.bf16.msra.mxu0 %v606
  %4005 = vmatprep.subr.bf16.mxu0 0
  %4006 = vmatpush1.bf16.msra.mxu0 %v607
  %4007 = vmatprep.subr.bf16.mxu0 0
  %4008 = vmatpush1.bf16.msra.mxu0 %v608
  %4009 = vmatprep.subr.bf16.mxu0 0
  %4010 = vmatpush1.bf16.msra.mxu0 %v609
  %4011 = vmatprep.subr.bf16.mxu0 0
  %4012 = vmatpush1.bf16.msra.mxu0 %v788
  %4013 = vmatprep.subr.bf16.mxu0 0
  %4014 = vmatpush1.bf16.msra.mxu0 0
  %4015 = vmatprep.subr.bf16.mxu0 0
  %4016 = vmatpush1.bf16.msra.mxu0 0
  %4017 = vmatprep.subr.bf16.mxu0 0
  %4018 = vmatpush1.bf16.msra.mxu0 0
  %4019 = vmatprep.subr.bf16.mxu0 0
  %4020 = vmatpush1.bf16.msra.mxu0 0
  %4021 = vmatprep.subr.bf16.mxu0 0
  %4022 = vmatpush1.bf16.msra.mxu0 0
  %4023 = vmatprep.subr.bf16.mxu0 0
  %4024 = vmatpush1.bf16.msra.mxu0 0
  %4025 = vmatprep.subr.bf16.mxu0 0
  %4026 = vmatpush1.bf16.msra.mxu0 0
  %4027 = vmatprep.mubr.bf16.mxu0 %v3887
  %4028 = vmatmul.mubr.bf16.gmra.mrb[0].mxu0 %v3839
  %v4029 = vpop.f32.mrb[0].mxu0
  %v4030 = vadd.f32 %v3942, %v4029
  %v4031 = vpop.f32.mrb[0].mxu0
  %v4032 = vpop.f32.mrb[0].mxu0
  %v4033 = vadd.f32 %v3945, %v4032
  %v4034 = vpop.f32.mrb[0].mxu0
  %4035 = vmatprep.mubr.bf16.mxu0 %v3890
  %4036 = vmatmul.mubr.bf16.gmra.mrb[0].mxu0 %v3843
  %v4037 = vpop.f32.mrb[0].mxu0
  %v4038 = vadd.f32 %v3950, %v4037
  %v4039 = vpop.f32.mrb[0].mxu0
  %v4040 = vpop.f32.mrb[0].mxu0
  %v4041 = vadd.f32 %v3953, %v4040
  %v4042 = vpop.f32.mrb[0].mxu0
  %4043 = vmatprep.mubr.bf16.mxu0 %v3893
  %4044 = vmatmul.mubr.bf16.gmra.mrb[0].mxu0 %v3847
  %v4045 = vpop.f32.mrb[0].mxu0
  %v4046 = vadd.f32 %v3958, %v4045
  %v4047 = vpop.f32.mrb[0].mxu0
  %v4048 = vpop.f32.mrb[0].mxu0
  %v4049 = vadd.f32 %v3961, %v4048
  %v4050 = vpop.f32.mrb[0].mxu0
  %4051 = vmatprep.mubr.bf16.mxu0 %v3896
  %4052 = vmatmul.mubr.bf16.gmra.mrb[0].mxu0 %v3851
  %v4053 = vpop.f32.mrb[0].mxu0
  %v4054 = vadd.f32 %v3966, %v4053
  %v4055 = vpop.f32.mrb[0].mxu0
  %v4056 = vpop.f32.mrb[0].mxu0
  %v4057 = vadd.f32 %v3969, %v4056
  %v4058 = vpop.f32.mrb[0].mxu0
  %4059 = vmatprep.mubr.bf16.mxu0 %v3899
  %4060 = vmatmul.mubr.bf16.gmra.mrb[0].mxu0 %v3855
  %v4061 = vpop.f32.mrb[0].mxu0
  %v4062 = vadd.f32 %v3974, %v4061
  %v4063 = vpop.f32.mrb[0].mxu0
  %v4064 = vpop.f32.mrb[0].mxu0
  %v4065 = vadd.f32 %v3977, %v4064
  %v4066 = vpop.f32.mrb[0].mxu0
  %4067 = vmatprep.mubr.bf16.mxu0 %v3902
  %4068 = vmatmul.mubr.bf16.gmra.mrb[0].mxu0 %v3859
  %v4069 = vpop.f32.mrb[0].mxu0
  %v4070 = vadd.f32 %v3982, %v4069
  %v4071 = vpop.f32.mrb[0].mxu0
  %v4072 = vpop.f32.mrb[0].mxu0
  %v4073 = vadd.f32 %v3985, %v4072
  %v4074 = vpop.f32.mrb[0].mxu0
  %4075 = vmatprep.mubr.bf16.mxu0 %v3905
  %4076 = vmatmul.mubr.bf16.gmra.mrb[0].mxu0 %v3863
  %v4077 = vpop.f32.mrb[0].mxu0
  %v4078 = vadd.f32 %v3990, %v4077
  %v4079 = vpop.f32.mrb[0].mxu0
  %v4080 = vpop.f32.mrb[0].mxu0
  %v4081 = vpop.f32.mrb[0].mxu0
  %4082 = vdwg.mxu0
  %v4083 = vpack.c.bf16 %v4033, %v4030
  %v4084 = vpack.c.bf16 %v4041, %v4038
  %v4085 = vpack.c.bf16 %v4049, %v4046
  %v4086 = vpack.c.bf16 %v4057, %v4054
  %v4087 = vpack.c.bf16 %v4065, %v4062
  %v4088 = vpack.c.bf16 %v4073, %v4070
  %v4089 = vpack.c.bf16 %v4078, %v4078
  %s4090 = scalar_lea.vmem %s4, 384
  %v4091 = vld [vmem:[%s4090] sm:$0xf]
  %v4092 = vld [vmem:[%s4090 + $0x4] sm:$0xf]
  %v4093 = vld [vmem:[%s4090 + $0x8] sm:$0xf]
  %v4094 = vld [vmem:[%s4090 + $0xc] sm:$0xf]
  %v4095 = vld [vmem:[%s4090 + $0x10] sm:$0xf]
  %v4096 = vld [vmem:[%s4090 + $0x14] sm:$0xf]
  %v4097 = vld [vmem:[%s4090 + $0x18] sm:$0xf]
  %v4098 = vld [vmem:[%s4090 + $0x1c] sm:$0xf]
  %v4099 = vld [vmem:[%s4090 + $0x20] sm:$0xf]
  %v4100 = vld [vmem:[%s4090 + $0x24] sm:$0xf]
  %v4101 = vld [vmem:[%s4090 + $0x28] sm:$0xf]
  %v4102 = vld [vmem:[%s4090 + $0x2c] sm:$0xf]
  %v4103 = vld [vmem:[%s4090 + $0x30] sm:$0xf]
  %v4104 = vld [vmem:[%s4090 + $0x34] sm:$0xf]
  %v4105 = vld [vmem:[%s4090 + $0x38] sm:$0xf]
  %v4106 = vld [vmem:[%s4090 + $0x3c] sm:$0xf]
  %v4123 = vunpack.c.l.b16 %v4091
  %v4124 = vunpack.c.l.b16 %v4092
  %v4125 = vunpack.c.l.b16 %v4093
  %v4126 = vunpack.c.l.b16 %v4094
  %v4127 = vunpack.c.l.b16 %v4095
  %v4128 = vunpack.c.l.b16 %v4096
  %v4129 = vunpack.c.l.b16 %v4097
  %v4130 = vunpack.c.l.b16 %v4098
  %v4131 = vunpack.c.l.b16 %v4099
  %v4132 = vunpack.c.l.b16 %v4100
  %v4133 = vunpack.c.l.b16 %v4101
  %v4134 = vunpack.c.l.b16 %v4102
  %v4135 = vunpack.c.l.b16 %v4103
  %v4136 = vunpack.c.l.b16 %v4104
  %v4137 = vunpack.c.l.b16 %v4105
  %v4138 = vunpack.c.l.b16 %v4106
  %v4139 = vpack.c.b16 %v4124, %v4123
  %v4140 = vpack.c.b16 %v4126, %v4125
  %v4141 = vpack.c.b16 %v4128, %v4127
  %v4142 = vpack.c.b16 %v4130, %v4129
  %v4143 = vpack.c.b16 %v4132, %v4131
  %v4144 = vpack.c.b16 %v4134, %v4133
  %v4145 = vpack.c.b16 %v4136, %v4135
  %v4146 = vpack.c.b16 %v4138, %v4137
  %4155 = vmatprep.subr.bf16.mxu0 0
  %4156 = vmatpush1.bf16.msra.mxu0 %v4139
  %4157 = vmatprep.subr.bf16.mxu0 0
  %4158 = vmatpush1.bf16.msra.mxu0 %v4140
  %4159 = vmatprep.subr.bf16.mxu0 0
  %4160 = vmatpush1.bf16.msra.mxu0 %v4141
  %4161 = vmatprep.subr.bf16.mxu0 0
  %4162 = vmatpush1.bf16.msra.mxu0 %v4142
  %4163 = vmatprep.subr.bf16.mxu0 0
  %4164 = vmatpush1.bf16.msra.mxu0 %v4143
  %4165 = vmatprep.subr.bf16.mxu0 0
  %4166 = vmatpush1.bf16.msra.mxu0 %v4144
  %4167 = vmatprep.subr.bf16.mxu0 0
  %4168 = vmatpush1.bf16.msra.mxu0 %v4145
  %4169 = vmatprep.subr.bf16.mxu0 0
  %4170 = vmatpush1.bf16.msra.mxu0 %v4146
  %4171 = vmatprep.subr.bf16.mxu0 0
  %4172 = vmatpush1.bf16.msra.mxu0 0
  %4173 = vmatprep.subr.bf16.mxu0 0
  %4174 = vmatpush1.bf16.msra.mxu0 0
  %4175 = vmatprep.subr.bf16.mxu0 0
  %4176 = vmatpush1.bf16.msra.mxu0 0
  %4177 = vmatprep.subr.bf16.mxu0 0
  %4178 = vmatpush1.bf16.msra.mxu0 0
  %4179 = vmatprep.subr.bf16.mxu0 0
  %4180 = vmatpush1.bf16.msra.mxu0 0
  %4181 = vmatprep.subr.bf16.mxu0 0
  %4182 = vmatpush1.bf16.msra.mxu0 0
  %4183 = vmatprep.subr.bf16.mxu0 0
  %4184 = vmatpush1.bf16.msra.mxu0 0
  %4185 = vmatprep.subr.bf16.mxu0 0
  %4186 = vmatpush1.bf16.msra.mxu0 0
  %4187 = vmatprep.mubr.bf16.mxu0 0
  %4188 = vmatmul.mubr.bf16.gmra.mrb[0].mxu0 %v4083
  %v4189 = vpop.f32.mrb[0].mxu0
  %v4190 = vadd.f32 0.0, %v4189
  %v4191 = vpop.f32.mrb[0].mxu0
  %v4192 = vpop.f32.mrb[0].mxu0
  %v4193 = vadd.f32 0.0, %v4192
  %v4194 = vpop.f32.mrb[0].mxu0
  %4195 = vmatprep.mubr.bf16.mxu0 0
  %4196 = vmatmul.mubr.bf16.gmra.mrb[0].mxu0 %v4084
  %v4197 = vpop.f32.mrb[0].mxu0
  %v4198 = vadd.f32 0.0, %v4197
  %v4199 = vpop.f32.mrb[0].mxu0
  %v4200 = vpop.f32.mrb[0].mxu0
  %v4201 = vadd.f32 0.0, %v4200
  %v4202 = vpop.f32.mrb[0].mxu0
  %4203 = vmatprep.mubr.bf16.mxu0 0
  %4204 = vmatmul.mubr.bf16.gmra.mrb[0].mxu0 %v4085
  %v4205 = vpop.f32.mrb[0].mxu0
  %v4206 = vadd.f32 0.0, %v4205
  %v4207 = vpop.f32.mrb[0].mxu0
  %v4208 = vpop.f32.mrb[0].mxu0
  %v4209 = vadd.f32 0.0, %v4208
  %v4210 = vpop.f32.mrb[0].mxu0
  %4211 = vmatprep.mubr.bf16.mxu0 0
  %4212 = vmatmul.mubr.bf16.gmra.mrb[0].mxu0 %v4086
  %v4213 = vpop.f32.mrb[0].mxu0
  %v4214 = vadd.f32 0.0, %v4213
  %v4215 = vpop.f32.mrb[0].mxu0
  %v4216 = vpop.f32.mrb[0].mxu0
  %v4217 = vadd.f32 0.0, %v4216
  %v4218 = vpop.f32.mrb[0].mxu0
  %4219 = vmatprep.mubr.bf16.mxu0 0
  %4220 = vmatmul.mubr.bf16.gmra.mrb[0].mxu0 %v4087
  %v4221 = vpop.f32.mrb[0].mxu0
  %v4222 = vadd.f32 0.0, %v4221
  %v4223 = vpop.f32.mrb[0].mxu0
  %v4224 = vpop.f32.mrb[0].mxu0
  %v4225 = vadd.f32 0.0, %v4224
  %v4226 = vpop.f32.mrb[0].mxu0
  %4227 = vmatprep.mubr.bf16.mxu0 0
  %4228 = vmatmul.mubr.bf16.gmra.mrb[0].mxu0 %v4088
  %v4229 = vpop.f32.mrb[0].mxu0
  %v4230 = vadd.f32 0.0, %v4229
  %v4231 = vpop.f32.mrb[0].mxu0
  %v4232 = vpop.f32.mrb[0].mxu0
  %v4233 = vadd.f32 0.0, %v4232
  %v4234 = vpop.f32.mrb[0].mxu0
  %4235 = vmatprep.mubr.bf16.mxu0 0
  %4236 = vmatmul.mubr.bf16.gmra.mrb[0].mxu0 %v4089
  %v4237 = vpop.f32.mrb[0].mxu0
  %v4238 = vadd.f32 0.0, %v4237
  %v4239 = vpop.f32.mrb[0].mxu0
  %v4240 = vpop.f32.mrb[0].mxu0
  %v4241 = vpop.f32.mrb[0].mxu0
  %4242 = vdwg.mxu0
  %v4243 = vadd.f32 %v3719, %v4190
  %v4244 = vadd.f32 %v3720, %v4193
  %v4245 = vadd.f32 %v3721, %v4198
  %v4246 = vadd.f32 %v3722, %v4201
  %v4247 = vadd.f32 %v3723, %v4206
  %v4248 = vadd.f32 %v3724, %v4209
  %v4249 = vadd.f32 %v3725, %v4214
  %v4250 = vadd.f32 %v3726, %v4217
  %v4251 = vadd.f32 %v3727, %v4222
  %v4252 = vadd.f32 %v3728, %v4225
  %v4253 = vadd.f32 %v3729, %v4230
  %v4254 = vadd.f32 %v3730, %v4233
  %v4255 = vadd.f32 %v3731, %v4238
  %s4256 = scalar_lea.vmem %s3, 1456
  %v4257 = vld [vmem:[%s4256] sm:$0xff]
  %v4258 = vld [vmem:[%s4256 + $0x8] sm:$0xff]
  %v4259 = vld [vmem:[%s4256 + $0x10] sm:$0xff]
  %v4260 = vld [vmem:[%s4256 + $0x18] sm:$0xff]
  %v4261 = vld [vmem:[%s4256 + $0x20] sm:$0xff]
  %v4262 = vld [vmem:[%s4256 + $0x28] sm:$0xff]
  %v4263 = vld [vmem:[%s4256 + $0x30] sm:$0xff]
  %v4264 = vld [vmem:[%s4256 + $0x38] sm:$0xff]
  %v4265 = vld [vmem:[%s4256 + $0x40] sm:$0xff]
  %v4266 = vld [vmem:[%s4256 + $0x48] sm:$0xff]
  %v4267 = vld [vmem:[%s4256 + $0x50] sm:$0xff]
  %v4268 = vld [vmem:[%s4256 + $0x58] sm:$0xff]
  %v4269 = vld [vmem:[%s4256 + $0x60] sm:$0xff]
  %v4270 = vld [vmem:[%s4256 + $0x68] sm:$0xff]
  %v4271 = vld [vmem:[%s4256 + $0x70] sm:$0xff]
  %v4272 = vld [vmem:[%s4256 + $0x78] sm:$0xff]
  %v4273 = vld [vmem:[%s4256 + $0x80] sm:$0xff]
  %v4274 = vld [vmem:[%s4256 + $0x88] sm:$0xff]
  %v4275 = vld [vmem:[%s4256 + $0x90] sm:$0xff]
  %v4276 = vld [vmem:[%s4256 + $0x98] sm:$0xff]
  %v4277 = vld [vmem:[%s4256 + $0xa0] sm:$0xff]
  %v4278 = vld [vmem:[%s4256 + $0xa8] sm:$0xff]
  %v4279 = vld [vmem:[%s4256 + $0xb0] sm:$0xff]
  %v4280 = vld [vmem:[%s4256 + $0xb8] sm:$0xff]
  %v4281 = vld [vmem:[%s4256 + $0xc0] sm:$0xff]
  %v4282 = vld [vmem:[%s4256 + $0xc8] sm:$0xff]
  %v4309 = vunpack.c.l.b16 %v4257
  %v4310 = vunpack.c.h.b16 %v4257
  %v4311 = vunpack.c.l.b16 %v4258
  %v4312 = vunpack.c.h.b16 %v4258
  %v4313 = vunpack.c.l.b16 %v4259
  %v4314 = vunpack.c.h.b16 %v4259
  %v4315 = vunpack.c.l.b16 %v4260
  %v4316 = vunpack.c.h.b16 %v4260
  %v4317 = vunpack.c.l.b16 %v4261
  %v4318 = vunpack.c.h.b16 %v4261
  %v4319 = vunpack.c.l.b16 %v4262
  %v4320 = vunpack.c.h.b16 %v4262
  %v4321 = vunpack.c.l.b16 %v4263
  %v4322 = vunpack.c.h.b16 %v4263
  %v4323 = vunpack.c.l.b16 %v4264
  %v4324 = vunpack.c.h.b16 %v4264
  %v4325 = vunpack.c.l.b16 %v4265
  %v4326 = vunpack.c.h.b16 %v4265
  %v4327 = vunpack.c.l.b16 %v4266
  %v4328 = vunpack.c.h.b16 %v4266
  %v4329 = vunpack.c.l.b16 %v4267
  %v4330 = vunpack.c.h.b16 %v4267
  %v4331 = vunpack.c.l.b16 %v4268
  %v4332 = vunpack.c.h.b16 %v4268
  %v4333 = vunpack.c.l.b16 %v4269
  %v4334 = vunpack.c.h.b16 %v4269
  %v4335 = vunpack.c.l.b16 %v4270
  %v4336 = vunpack.c.h.b16 %v4270
  %v4337 = vunpack.c.l.b16 %v4271
  %v4338 = vunpack.c.h.b16 %v4271
  %v4339 = vunpack.c.l.b16 %v4272
  %v4340 = vunpack.c.h.b16 %v4272
  %v4341 = vunpack.c.l.b16 %v4273
  %v4342 = vunpack.c.h.b16 %v4273
  %v4343 = vunpack.c.l.b16 %v4274
  %v4344 = vunpack.c.h.b16 %v4274
  %v4345 = vunpack.c.l.b16 %v4275
  %v4346 = vunpack.c.h.b16 %v4275
  %v4347 = vunpack.c.l.b16 %v4276
  %v4348 = vunpack.c.h.b16 %v4276
  %v4349 = vunpack.c.l.b16 %v4277
  %v4350 = vunpack.c.h.b16 %v4277
  %v4351 = vunpack.c.l.b16 %v4278
  %v4352 = vunpack.c.h.b16 %v4278
  %v4353 = vunpack.c.l.b16 %v4279
  %v4354 = vunpack.c.h.b16 %v4279
  %v4355 = vunpack.c.l.b16 %v4280
  %v4356 = vunpack.c.h.b16 %v4280
  %v4357 = vunpack.c.l.b16 %v4281
  %v4358 = vunpack.c.h.b16 %v4281
  %v4359 = vunpack.c.l.b16 %v4282
  %v4360 = vunpack.c.h.b16 %v4282
  %v4361 = vpack.c.b16 %v4313, %v4309
  %v4362 = vpack.c.b16 %v4314, %v4310
  %v4363 = vpack.c.b16 %v4315, %v4311
  %v4364 = vpack.c.b16 %v4316, %v4312
  %v4365 = vpack.c.b16 %v4321, %v4317
  %v4366 = vpack.c.b16 %v4322, %v4318
  %v4367 = vpack.c.b16 %v4323, %v4319
  %v4368 = vpack.c.b16 %v4324, %v4320
  %v4369 = vpack.c.b16 %v4329, %v4325
  %v4370 = vpack.c.b16 %v4330, %v4326
  %v4371 = vpack.c.b16 %v4331, %v4327
  %v4372 = vpack.c.b16 %v4332, %v4328
  %v4373 = vpack.c.b16 %v4337, %v4333
  %v4374 = vpack.c.b16 %v4338, %v4334
  %v4375 = vpack.c.b16 %v4339, %v4335
  %v4376 = vpack.c.b16 %v4340, %v4336
  %v4377 = vpack.c.b16 %v4345, %v4341
  %v4378 = vpack.c.b16 %v4346, %v4342
  %v4379 = vpack.c.b16 %v4347, %v4343
  %v4380 = vpack.c.b16 %v4348, %v4344
  %v4381 = vpack.c.b16 %v4353, %v4349
  %v4382 = vpack.c.b16 %v4354, %v4350
  %v4383 = vpack.c.b16 %v4355, %v4351
  %v4384 = vpack.c.b16 %v4356, %v4352
  %v4385 = vpack.c.b16 %v4357, %v4357
  %v4386 = vpack.c.b16 %v4358, %v4358
  %v4387 = vpack.c.b16 %v4359, %v4359
  %v4388 = vpack.c.b16 %v4360, %v4360
  %v4411 = vsel %vm764, %v4364, 0
  %v4414 = vsel %vm764, %v4368, 0
  %v4417 = vsel %vm764, %v4372, 0
  %v4420 = vsel %vm764, %v4376, 0
  %v4423 = vsel %vm764, %v4380, 0
  %v4426 = vsel %vm764, %v4384, 0
  %v4429 = vsel %vm764, %v4388, 0
  %4431 = vmatprep.subr.bf16.mxu0 0
  %4432 = vmatpush1.bf16.msra.mxu0 %v586
  %4433 = vmatprep.subr.bf16.mxu0 0
  %4434 = vmatpush1.bf16.msra.mxu0 %v587
  %4435 = vmatprep.subr.bf16.mxu0 0
  %4436 = vmatpush1.bf16.msra.mxu0 %v588
  %4437 = vmatprep.subr.bf16.mxu0 0
  %4438 = vmatpush1.bf16.msra.mxu0 %v589
  %4439 = vmatprep.subr.bf16.mxu0 0
  %4440 = vmatpush1.bf16.msra.mxu0 %v590
  %4441 = vmatprep.subr.bf16.mxu0 0
  %4442 = vmatpush1.bf16.msra.mxu0 %v591
  %4443 = vmatprep.subr.bf16.mxu0 0
  %4444 = vmatpush1.bf16.msra.mxu0 %v592
  %4445 = vmatprep.subr.bf16.mxu0 0
  %4446 = vmatpush1.bf16.msra.mxu0 %v593
  %4447 = vmatprep.subr.bf16.mxu0 0
  %4448 = vmatpush1.bf16.msra.mxu0 %v594
  %4449 = vmatprep.subr.bf16.mxu0 0
  %4450 = vmatpush1.bf16.msra.mxu0 %v595
  %4451 = vmatprep.subr.bf16.mxu0 0
  %4452 = vmatpush1.bf16.msra.mxu0 %v596
  %4453 = vmatprep.subr.bf16.mxu0 0
  %4454 = vmatpush1.bf16.msra.mxu0 %v597
  %4455 = vmatprep.subr.bf16.mxu0 0
  %4456 = vmatpush1.bf16.msra.mxu0 %v598
  %4457 = vmatprep.subr.bf16.mxu0 0
  %4458 = vmatpush1.bf16.msra.mxu0 %v599
  %4459 = vmatprep.subr.bf16.mxu0 0
  %4460 = vmatpush1.bf16.msra.mxu0 %v600
  %4461 = vmatprep.subr.bf16.mxu0 0
  %4462 = vmatpush1.bf16.msra.mxu0 %v601
  %4463 = vmatprep.mubr.bf16.mxu0 %v4362
  %4464 = vmatmul.mubr.bf16.gmra.mrb[0].mxu0 %v4361
  %v4465 = vpop.f32.mrb[0].mxu0
  %v4466 = vadd.f32 0.0, %v4465
  %v4467 = vpop.f32.mrb[0].mxu0
  %v4468 = vpop.f32.mrb[0].mxu0
  %v4469 = vadd.f32 0.0, %v4468
  %v4470 = vpop.f32.mrb[0].mxu0
  %4471 = vmatprep.mubr.bf16.mxu0 %v4366
  %4472 = vmatmul.mubr.bf16.gmra.mrb[0].mxu0 %v4365
  %v4473 = vpop.f32.mrb[0].mxu0
  %v4474 = vadd.f32 0.0, %v4473
  %v4475 = vpop.f32.mrb[0].mxu0
  %v4476 = vpop.f32.mrb[0].mxu0
  %v4477 = vadd.f32 0.0, %v4476
  %v4478 = vpop.f32.mrb[0].mxu0
  %4479 = vmatprep.mubr.bf16.mxu0 %v4370
  %4480 = vmatmul.mubr.bf16.gmra.mrb[0].mxu0 %v4369
  %v4481 = vpop.f32.mrb[0].mxu0
  %v4482 = vadd.f32 0.0, %v4481
  %v4483 = vpop.f32.mrb[0].mxu0
  %v4484 = vpop.f32.mrb[0].mxu0
  %v4485 = vadd.f32 0.0, %v4484
  %v4486 = vpop.f32.mrb[0].mxu0
  %4487 = vmatprep.mubr.bf16.mxu0 %v4374
  %4488 = vmatmul.mubr.bf16.gmra.mrb[0].mxu0 %v4373
  %v4489 = vpop.f32.mrb[0].mxu0
  %v4490 = vadd.f32 0.0, %v4489
  %v4491 = vpop.f32.mrb[0].mxu0
  %v4492 = vpop.f32.mrb[0].mxu0
  %v4493 = vadd.f32 0.0, %v4492
  %v4494 = vpop.f32.mrb[0].mxu0
  %4495 = vmatprep.mubr.bf16.mxu0 %v4378
  %4496 = vmatmul.mubr.bf16.gmra.mrb[0].mxu0 %v4377
  %v4497 = vpop.f32.mrb[0].mxu0
  %v4498 = vadd.f32 0.0, %v4497
  %v4499 = vpop.f32.mrb[0].mxu0
  %v4500 = vpop.f32.mrb[0].mxu0
  %v4501 = vadd.f32 0.0, %v4500
  %v4502 = vpop.f32.mrb[0].mxu0
  %4503 = vmatprep.mubr.bf16.mxu0 %v4382
  %4504 = vmatmul.mubr.bf16.gmra.mrb[0].mxu0 %v4381
  %v4505 = vpop.f32.mrb[0].mxu0
  %v4506 = vadd.f32 0.0, %v4505
  %v4507 = vpop.f32.mrb[0].mxu0
  %v4508 = vpop.f32.mrb[0].mxu0
  %v4509 = vadd.f32 0.0, %v4508
  %v4510 = vpop.f32.mrb[0].mxu0
  %4511 = vmatprep.mubr.bf16.mxu0 %v4386
  %4512 = vmatmul.mubr.bf16.gmra.mrb[0].mxu0 %v4385
  %v4513 = vpop.f32.mrb[0].mxu0
  %v4514 = vadd.f32 0.0, %v4513
  %v4515 = vpop.f32.mrb[0].mxu0
  %v4516 = vpop.f32.mrb[0].mxu0
  %v4517 = vpop.f32.mrb[0].mxu0
  %4518 = vdwg.mxu0
  %4519 = vmatprep.subr.bf16.mxu0 0
  %4520 = vmatpush1.bf16.msra.mxu0 %v602
  %4521 = vmatprep.subr.bf16.mxu0 0
  %4522 = vmatpush1.bf16.msra.mxu0 %v603
  %4523 = vmatprep.subr.bf16.mxu0 0
  %4524 = vmatpush1.bf16.msra.mxu0 %v604
  %4525 = vmatprep.subr.bf16.mxu0 0
  %4526 = vmatpush1.bf16.msra.mxu0 %v605
  %4527 = vmatprep.subr.bf16.mxu0 0
  %4528 = vmatpush1.bf16.msra.mxu0 %v606
  %4529 = vmatprep.subr.bf16.mxu0 0
  %4530 = vmatpush1.bf16.msra.mxu0 %v607
  %4531 = vmatprep.subr.bf16.mxu0 0
  %4532 = vmatpush1.bf16.msra.mxu0 %v608
  %4533 = vmatprep.subr.bf16.mxu0 0
  %4534 = vmatpush1.bf16.msra.mxu0 %v609
  %4535 = vmatprep.subr.bf16.mxu0 0
  %4536 = vmatpush1.bf16.msra.mxu0 %v788
  %4537 = vmatprep.subr.bf16.mxu0 0
  %4538 = vmatpush1.bf16.msra.mxu0 0
  %4539 = vmatprep.subr.bf16.mxu0 0
  %4540 = vmatpush1.bf16.msra.mxu0 0
  %4541 = vmatprep.subr.bf16.mxu0 0
  %4542 = vmatpush1.bf16.msra.mxu0 0
  %4543 = vmatprep.subr.bf16.mxu0 0
  %4544 = vmatpush1.bf16.msra.mxu0 0
  %4545 = vmatprep.subr.bf16.mxu0 0
  %4546 = vmatpush1.bf16.msra.mxu0 0
  %4547 = vmatprep.subr.bf16.mxu0 0
  %4548 = vmatpush1.bf16.msra.mxu0 0
  %4549 = vmatprep.subr.bf16.mxu0 0
  %4550 = vmatpush1.bf16.msra.mxu0 0
  %4551 = vmatprep.mubr.bf16.mxu0 %v4411
  %4552 = vmatmul.mubr.bf16.gmra.mrb[0].mxu0 %v4363
  %v4553 = vpop.f32.mrb[0].mxu0
  %v4554 = vadd.f32 %v4466, %v4553
  %v4555 = vpop.f32.mrb[0].mxu0
  %v4556 = vpop.f32.mrb[0].mxu0
  %v4557 = vadd.f32 %v4469, %v4556
  %v4558 = vpop.f32.mrb[0].mxu0
  %4559 = vmatprep.mubr.bf16.mxu0 %v4414
  %4560 = vmatmul.mubr.bf16.gmra.mrb[0].mxu0 %v4367
  %v4561 = vpop.f32.mrb[0].mxu0
  %v4562 = vadd.f32 %v4474, %v4561
  %v4563 = vpop.f32.mrb[0].mxu0
  %v4564 = vpop.f32.mrb[0].mxu0
  %v4565 = vadd.f32 %v4477, %v4564
  %v4566 = vpop.f32.mrb[0].mxu0
  %4567 = vmatprep.mubr.bf16.mxu0 %v4417
  %4568 = vmatmul.mubr.bf16.gmra.mrb[0].mxu0 %v4371
  %v4569 = vpop.f32.mrb[0].mxu0
  %v4570 = vadd.f32 %v4482, %v4569
  %v4571 = vpop.f32.mrb[0].mxu0
  %v4572 = vpop.f32.mrb[0].mxu0
  %v4573 = vadd.f32 %v4485, %v4572
  %v4574 = vpop.f32.mrb[0].mxu0
  %4575 = vmatprep.mubr.bf16.mxu0 %v4420
  %4576 = vmatmul.mubr.bf16.gmra.mrb[0].mxu0 %v4375
  %v4577 = vpop.f32.mrb[0].mxu0
  %v4578 = vadd.f32 %v4490, %v4577
  %v4579 = vpop.f32.mrb[0].mxu0
  %v4580 = vpop.f32.mrb[0].mxu0
  %v4581 = vadd.f32 %v4493, %v4580
  %v4582 = vpop.f32.mrb[0].mxu0
  %4583 = vmatprep.mubr.bf16.mxu0 %v4423
  %4584 = vmatmul.mubr.bf16.gmra.mrb[0].mxu0 %v4379
  %v4585 = vpop.f32.mrb[0].mxu0
  %v4586 = vadd.f32 %v4498, %v4585
  %v4587 = vpop.f32.mrb[0].mxu0
  %v4588 = vpop.f32.mrb[0].mxu0
  %v4589 = vadd.f32 %v4501, %v4588
  %v4590 = vpop.f32.mrb[0].mxu0
  %4591 = vmatprep.mubr.bf16.mxu0 %v4426
  %4592 = vmatmul.mubr.bf16.gmra.mrb[0].mxu0 %v4383
  %v4593 = vpop.f32.mrb[0].mxu0
  %v4594 = vadd.f32 %v4506, %v4593
  %v4595 = vpop.f32.mrb[0].mxu0
  %v4596 = vpop.f32.mrb[0].mxu0
  %v4597 = vadd.f32 %v4509, %v4596
  %v4598 = vpop.f32.mrb[0].mxu0
  %4599 = vmatprep.mubr.bf16.mxu0 %v4429
  %4600 = vmatmul.mubr.bf16.gmra.mrb[0].mxu0 %v4387
  %v4601 = vpop.f32.mrb[0].mxu0
  %v4602 = vadd.f32 %v4514, %v4601
  %v4603 = vpop.f32.mrb[0].mxu0
  %v4604 = vpop.f32.mrb[0].mxu0
  %v4605 = vpop.f32.mrb[0].mxu0
  %4606 = vdwg.mxu0
  %v4607 = vpack.c.bf16 %v4557, %v4554
  %v4608 = vpack.c.bf16 %v4565, %v4562
  %v4609 = vpack.c.bf16 %v4573, %v4570
  %v4610 = vpack.c.bf16 %v4581, %v4578
  %v4611 = vpack.c.bf16 %v4589, %v4586
  %v4612 = vpack.c.bf16 %v4597, %v4594
  %v4613 = vpack.c.bf16 %v4602, %v4602
  %s4614 = scalar_lea.vmem %s4, 448
  %v4615 = vld [vmem:[%s4614] sm:$0xf]
  %v4616 = vld [vmem:[%s4614 + $0x4] sm:$0xf]
  %v4617 = vld [vmem:[%s4614 + $0x8] sm:$0xf]
  %v4618 = vld [vmem:[%s4614 + $0xc] sm:$0xf]
  %v4619 = vld [vmem:[%s4614 + $0x10] sm:$0xf]
  %v4620 = vld [vmem:[%s4614 + $0x14] sm:$0xf]
  %v4621 = vld [vmem:[%s4614 + $0x18] sm:$0xf]
  %v4622 = vld [vmem:[%s4614 + $0x1c] sm:$0xf]
  %v4623 = vld [vmem:[%s4614 + $0x20] sm:$0xf]
  %v4624 = vld [vmem:[%s4614 + $0x24] sm:$0xf]
  %v4625 = vld [vmem:[%s4614 + $0x28] sm:$0xf]
  %v4626 = vld [vmem:[%s4614 + $0x2c] sm:$0xf]
  %v4627 = vld [vmem:[%s4614 + $0x30] sm:$0xf]
  %v4628 = vld [vmem:[%s4614 + $0x34] sm:$0xf]
  %v4629 = vld [vmem:[%s4614 + $0x38] sm:$0xf]
  %v4630 = vld [vmem:[%s4614 + $0x3c] sm:$0xf]
  %v4647 = vunpack.c.l.b16 %v4615
  %v4648 = vunpack.c.l.b16 %v4616
  %v4649 = vunpack.c.l.b16 %v4617
  %v4650 = vunpack.c.l.b16 %v4618
  %v4651 = vunpack.c.l.b16 %v4619
  %v4652 = vunpack.c.l.b16 %v4620
  %v4653 = vunpack.c.l.b16 %v4621
  %v4654 = vunpack.c.l.b16 %v4622
  %v4655 = vunpack.c.l.b16 %v4623
  %v4656 = vunpack.c.l.b16 %v4624
  %v4657 = vunpack.c.l.b16 %v4625
  %v4658 = vunpack.c.l.b16 %v4626
  %v4659 = vunpack.c.l.b16 %v4627
  %v4660 = vunpack.c.l.b16 %v4628
  %v4661 = vunpack.c.l.b16 %v4629
  %v4662 = vunpack.c.l.b16 %v4630
  %v4663 = vpack.c.b16 %v4648, %v4647
  %v4664 = vpack.c.b16 %v4650, %v4649
  %v4665 = vpack.c.b16 %v4652, %v4651
  %v4666 = vpack.c.b16 %v4654, %v4653
  %v4667 = vpack.c.b16 %v4656, %v4655
  %v4668 = vpack.c.b16 %v4658, %v4657
  %v4669 = vpack.c.b16 %v4660, %v4659
  %v4670 = vpack.c.b16 %v4662, %v4661
  %4679 = vmatprep.subr.bf16.mxu0 0
  %4680 = vmatpush1.bf16.msra.mxu0 %v4663
  %4681 = vmatprep.subr.bf16.mxu0 0
  %4682 = vmatpush1.bf16.msra.mxu0 %v4664
  %4683 = vmatprep.subr.bf16.mxu0 0
  %4684 = vmatpush1.bf16.msra.mxu0 %v4665
  %4685 = vmatprep.subr.bf16.mxu0 0
  %4686 = vmatpush1.bf16.msra.mxu0 %v4666
  %4687 = vmatprep.subr.bf16.mxu0 0
  %4688 = vmatpush1.bf16.msra.mxu0 %v4667
  %4689 = vmatprep.subr.bf16.mxu0 0
  %4690 = vmatpush1.bf16.msra.mxu0 %v4668
  %4691 = vmatprep.subr.bf16.mxu0 0
  %4692 = vmatpush1.bf16.msra.mxu0 %v4669
  %4693 = vmatprep.subr.bf16.mxu0 0
  %4694 = vmatpush1.bf16.msra.mxu0 %v4670
  %4695 = vmatprep.subr.bf16.mxu0 0
  %4696 = vmatpush1.bf16.msra.mxu0 0
  %4697 = vmatprep.subr.bf16.mxu0 0
  %4698 = vmatpush1.bf16.msra.mxu0 0
  %4699 = vmatprep.subr.bf16.mxu0 0
  %4700 = vmatpush1.bf16.msra.mxu0 0
  %4701 = vmatprep.subr.bf16.mxu0 0
  %4702 = vmatpush1.bf16.msra.mxu0 0
  %4703 = vmatprep.subr.bf16.mxu0 0
  %4704 = vmatpush1.bf16.msra.mxu0 0
  %4705 = vmatprep.subr.bf16.mxu0 0
  %4706 = vmatpush1.bf16.msra.mxu0 0
  %4707 = vmatprep.subr.bf16.mxu0 0
  %4708 = vmatpush1.bf16.msra.mxu0 0
  %4709 = vmatprep.subr.bf16.mxu0 0
  %4710 = vmatpush1.bf16.msra.mxu0 0
  %4711 = vmatprep.mubr.bf16.mxu0 0
  %4712 = vmatmul.mubr.bf16.gmra.mrb[0].mxu0 %v4607
  %v4713 = vpop.f32.mrb[0].mxu0
  %v4714 = vadd.f32 0.0, %v4713
  %v4715 = vpop.f32.mrb[0].mxu0
  %v4716 = vpop.f32.mrb[0].mxu0
  %v4717 = vadd.f32 0.0, %v4716
  %v4718 = vpop.f32.mrb[0].mxu0
  %4719 = vmatprep.mubr.bf16.mxu0 0
  %4720 = vmatmul.mubr.bf16.gmra.mrb[0].mxu0 %v4608
  %v4721 = vpop.f32.mrb[0].mxu0
  %v4722 = vadd.f32 0.0, %v4721
  %v4723 = vpop.f32.mrb[0].mxu0
  %v4724 = vpop.f32.mrb[0].mxu0
  %v4725 = vadd.f32 0.0, %v4724
  %v4726 = vpop.f32.mrb[0].mxu0
  %4727 = vmatprep.mubr.bf16.mxu0 0
  %4728 = vmatmul.mubr.bf16.gmra.mrb[0].mxu0 %v4609
  %v4729 = vpop.f32.mrb[0].mxu0
  %v4730 = vadd.f32 0.0, %v4729
  %v4731 = vpop.f32.mrb[0].mxu0
  %v4732 = vpop.f32.mrb[0].mxu0
  %v4733 = vadd.f32 0.0, %v4732
  %v4734 = vpop.f32.mrb[0].mxu0
  %4735 = vmatprep.mubr.bf16.mxu0 0
  %4736 = vmatmul.mubr.bf16.gmra.mrb[0].mxu0 %v4610
  %v4737 = vpop.f32.mrb[0].mxu0
  %v4738 = vadd.f32 0.0, %v4737
  %v4739 = vpop.f32.mrb[0].mxu0
  %v4740 = vpop.f32.mrb[0].mxu0
  %v4741 = vadd.f32 0.0, %v4740
  %v4742 = vpop.f32.mrb[0].mxu0
  %4743 = vmatprep.mubr.bf16.mxu0 0
  %4744 = vmatmul.mubr.bf16.gmra.mrb[0].mxu0 %v4611
  %v4745 = vpop.f32.mrb[0].mxu0
  %v4746 = vadd.f32 0.0, %v4745
  %v4747 = vpop.f32.mrb[0].mxu0
  %v4748 = vpop.f32.mrb[0].mxu0
  %v4749 = vadd.f32 0.0, %v4748
  %v4750 = vpop.f32.mrb[0].mxu0
  %4751 = vmatprep.mubr.bf16.mxu0 0
  %4752 = vmatmul.mubr.bf16.gmra.mrb[0].mxu0 %v4612
  %v4753 = vpop.f32.mrb[0].mxu0
  %v4754 = vadd.f32 0.0, %v4753
  %v4755 = vpop.f32.mrb[0].mxu0
  %v4756 = vpop.f32.mrb[0].mxu0
  %v4757 = vadd.f32 0.0, %v4756
  %v4758 = vpop.f32.mrb[0].mxu0
  %4759 = vmatprep.mubr.bf16.mxu0 0
  %4760 = vmatmul.mubr.bf16.gmra.mrb[0].mxu0 %v4613
  %v4761 = vpop.f32.mrb[0].mxu0
  %v4762 = vadd.f32 0.0, %v4761
  %v4763 = vpop.f32.mrb[0].mxu0
  %v4764 = vpop.f32.mrb[0].mxu0
  %v4765 = vpop.f32.mrb[0].mxu0
  %4766 = vdwg.mxu0
  %v4767 = vadd.f32 %v4243, %v4714
  %v4768 = vadd.f32 %v4244, %v4717
  %v4769 = vadd.f32 %v4245, %v4722
  %v4770 = vadd.f32 %v4246, %v4725
  %v4771 = vadd.f32 %v4247, %v4730
  %v4772 = vadd.f32 %v4248, %v4733
  %v4773 = vadd.f32 %v4249, %v4738
  %v4774 = vadd.f32 %v4250, %v4741
  %v4775 = vadd.f32 %v4251, %v4746
  %v4776 = vadd.f32 %v4252, %v4749
  %v4777 = vadd.f32 %v4253, %v4754
  %v4778 = vadd.f32 %v4254, %v4757
  %v4779 = vadd.f32 %v4255, %v4762
  %s4780 = scalar_lea.vmem %s3, 1664
  %v4781 = vld [vmem:[%s4780] sm:$0xff]
  %v4782 = vld [vmem:[%s4780 + $0x8] sm:$0xff]
  %v4783 = vld [vmem:[%s4780 + $0x10] sm:$0xff]
  %v4784 = vld [vmem:[%s4780 + $0x18] sm:$0xff]
  %v4785 = vld [vmem:[%s4780 + $0x20] sm:$0xff]
  %v4786 = vld [vmem:[%s4780 + $0x28] sm:$0xff]
  %v4787 = vld [vmem:[%s4780 + $0x30] sm:$0xff]
  %v4788 = vld [vmem:[%s4780 + $0x38] sm:$0xff]
  %v4789 = vld [vmem:[%s4780 + $0x40] sm:$0xff]
  %v4790 = vld [vmem:[%s4780 + $0x48] sm:$0xff]
  %v4791 = vld [vmem:[%s4780 + $0x50] sm:$0xff]
  %v4792 = vld [vmem:[%s4780 + $0x58] sm:$0xff]
  %v4793 = vld [vmem:[%s4780 + $0x60] sm:$0xff]
  %v4794 = vld [vmem:[%s4780 + $0x68] sm:$0xff]
  %v4795 = vld [vmem:[%s4780 + $0x70] sm:$0xff]
  %v4796 = vld [vmem:[%s4780 + $0x78] sm:$0xff]
  %v4797 = vld [vmem:[%s4780 + $0x80] sm:$0xff]
  %v4798 = vld [vmem:[%s4780 + $0x88] sm:$0xff]
  %v4799 = vld [vmem:[%s4780 + $0x90] sm:$0xff]
  %v4800 = vld [vmem:[%s4780 + $0x98] sm:$0xff]
  %v4801 = vld [vmem:[%s4780 + $0xa0] sm:$0xff]
  %v4802 = vld [vmem:[%s4780 + $0xa8] sm:$0xff]
  %v4803 = vld [vmem:[%s4780 + $0xb0] sm:$0xff]
  %v4804 = vld [vmem:[%s4780 + $0xb8] sm:$0xff]
  %v4805 = vld [vmem:[%s4780 + $0xc0] sm:$0xff]
  %v4806 = vld [vmem:[%s4780 + $0xc8] sm:$0xff]
  %v4833 = vunpack.c.l.b16 %v4781
  %v4834 = vunpack.c.h.b16 %v4781
  %v4835 = vunpack.c.l.b16 %v4782
  %v4836 = vunpack.c.h.b16 %v4782
  %v4837 = vunpack.c.l.b16 %v4783
  %v4838 = vunpack.c.h.b16 %v4783
  %v4839 = vunpack.c.l.b16 %v4784
  %v4840 = vunpack.c.h.b16 %v4784
  %v4841 = vunpack.c.l.b16 %v4785
  %v4842 = vunpack.c.h.b16 %v4785
  %v4843 = vunpack.c.l.b16 %v4786
  %v4844 = vunpack.c.h.b16 %v4786
  %v4845 = vunpack.c.l.b16 %v4787
  %v4846 = vunpack.c.h.b16 %v4787
  %v4847 = vunpack.c.l.b16 %v4788
  %v4848 = vunpack.c.h.b16 %v4788
  %v4849 = vunpack.c.l.b16 %v4789
  %v4850 = vunpack.c.h.b16 %v4789
  %v4851 = vunpack.c.l.b16 %v4790
  %v4852 = vunpack.c.h.b16 %v4790
  %v4853 = vunpack.c.l.b16 %v4791
  %v4854 = vunpack.c.h.b16 %v4791
  %v4855 = vunpack.c.l.b16 %v4792
  %v4856 = vunpack.c.h.b16 %v4792
  %v4857 = vunpack.c.l.b16 %v4793
  %v4858 = vunpack.c.h.b16 %v4793
  %v4859 = vunpack.c.l.b16 %v4794
  %v4860 = vunpack.c.h.b16 %v4794
  %v4861 = vunpack.c.l.b16 %v4795
  %v4862 = vunpack.c.h.b16 %v4795
  %v4863 = vunpack.c.l.b16 %v4796
  %v4864 = vunpack.c.h.b16 %v4796
  %v4865 = vunpack.c.l.b16 %v4797
  %v4866 = vunpack.c.h.b16 %v4797
  %v4867 = vunpack.c.l.b16 %v4798
  %v4868 = vunpack.c.h.b16 %v4798
  %v4869 = vunpack.c.l.b16 %v4799
  %v4870 = vunpack.c.h.b16 %v4799
  %v4871 = vunpack.c.l.b16 %v4800
  %v4872 = vunpack.c.h.b16 %v4800
  %v4873 = vunpack.c.l.b16 %v4801
  %v4874 = vunpack.c.h.b16 %v4801
  %v4875 = vunpack.c.l.b16 %v4802
  %v4876 = vunpack.c.h.b16 %v4802
  %v4877 = vunpack.c.l.b16 %v4803
  %v4878 = vunpack.c.h.b16 %v4803
  %v4879 = vunpack.c.l.b16 %v4804
  %v4880 = vunpack.c.h.b16 %v4804
  %v4881 = vunpack.c.l.b16 %v4805
  %v4882 = vunpack.c.h.b16 %v4805
  %v4883 = vunpack.c.l.b16 %v4806
  %v4884 = vunpack.c.h.b16 %v4806
  %v4885 = vpack.c.b16 %v4837, %v4833
  %v4886 = vpack.c.b16 %v4838, %v4834
  %v4887 = vpack.c.b16 %v4839, %v4835
  %v4888 = vpack.c.b16 %v4840, %v4836
  %v4889 = vpack.c.b16 %v4845, %v4841
  %v4890 = vpack.c.b16 %v4846, %v4842
  %v4891 = vpack.c.b16 %v4847, %v4843
  %v4892 = vpack.c.b16 %v4848, %v4844
  %v4893 = vpack.c.b16 %v4853, %v4849
  %v4894 = vpack.c.b16 %v4854, %v4850
  %v4895 = vpack.c.b16 %v4855, %v4851
  %v4896 = vpack.c.b16 %v4856, %v4852
  %v4897 = vpack.c.b16 %v4861, %v4857
  %v4898 = vpack.c.b16 %v4862, %v4858
  %v4899 = vpack.c.b16 %v4863, %v4859
  %v4900 = vpack.c.b16 %v4864, %v4860
  %v4901 = vpack.c.b16 %v4869, %v4865
  %v4902 = vpack.c.b16 %v4870, %v4866
  %v4903 = vpack.c.b16 %v4871, %v4867
  %v4904 = vpack.c.b16 %v4872, %v4868
  %v4905 = vpack.c.b16 %v4877, %v4873
  %v4906 = vpack.c.b16 %v4878, %v4874
  %v4907 = vpack.c.b16 %v4879, %v4875
  %v4908 = vpack.c.b16 %v4880, %v4876
  %v4909 = vpack.c.b16 %v4881, %v4881
  %v4910 = vpack.c.b16 %v4882, %v4882
  %v4911 = vpack.c.b16 %v4883, %v4883
  %v4912 = vpack.c.b16 %v4884, %v4884
  %v4935 = vsel %vm764, %v4888, 0
  %v4938 = vsel %vm764, %v4892, 0
  %v4941 = vsel %vm764, %v4896, 0
  %v4944 = vsel %vm764, %v4900, 0
  %v4947 = vsel %vm764, %v4904, 0
  %v4950 = vsel %vm764, %v4908, 0
  %v4953 = vsel %vm764, %v4912, 0
  %4955 = vmatprep.subr.bf16.mxu0 0
  %4956 = vmatpush1.bf16.msra.mxu0 %v586
  %4957 = vmatprep.subr.bf16.mxu0 0
  %4958 = vmatpush1.bf16.msra.mxu0 %v587
  %4959 = vmatprep.subr.bf16.mxu0 0
  %4960 = vmatpush1.bf16.msra.mxu0 %v588
  %4961 = vmatprep.subr.bf16.mxu0 0
  %4962 = vmatpush1.bf16.msra.mxu0 %v589
  %4963 = vmatprep.subr.bf16.mxu0 0
  %4964 = vmatpush1.bf16.msra.mxu0 %v590
  %4965 = vmatprep.subr.bf16.mxu0 0
  %4966 = vmatpush1.bf16.msra.mxu0 %v591
  %4967 = vmatprep.subr.bf16.mxu0 0
  %4968 = vmatpush1.bf16.msra.mxu0 %v592
  %4969 = vmatprep.subr.bf16.mxu0 0
  %4970 = vmatpush1.bf16.msra.mxu0 %v593
  %4971 = vmatprep.subr.bf16.mxu0 0
  %4972 = vmatpush1.bf16.msra.mxu0 %v594
  %4973 = vmatprep.subr.bf16.mxu0 0
  %4974 = vmatpush1.bf16.msra.mxu0 %v595
  %4975 = vmatprep.subr.bf16.mxu0 0
  %4976 = vmatpush1.bf16.msra.mxu0 %v596
  %4977 = vmatprep.subr.bf16.mxu0 0
  %4978 = vmatpush1.bf16.msra.mxu0 %v597
  %4979 = vmatprep.subr.bf16.mxu0 0
  %4980 = vmatpush1.bf16.msra.mxu0 %v598
  %4981 = vmatprep.subr.bf16.mxu0 0
  %4982 = vmatpush1.bf16.msra.mxu0 %v599
  %4983 = vmatprep.subr.bf16.mxu0 0
  %4984 = vmatpush1.bf16.msra.mxu0 %v600
  %4985 = vmatprep.subr.bf16.mxu0 0
  %4986 = vmatpush1.bf16.msra.mxu0 %v601
  %4987 = vmatprep.mubr.bf16.mxu0 %v4886
  %4988 = vmatmul.mubr.bf16.gmra.mrb[0].mxu0 %v4885
  %v4989 = vpop.f32.mrb[0].mxu0
  %v4990 = vadd.f32 0.0, %v4989
  %v4991 = vpop.f32.mrb[0].mxu0
  %v4992 = vpop.f32.mrb[0].mxu0
  %v4993 = vadd.f32 0.0, %v4992
  %v4994 = vpop.f32.mrb[0].mxu0
  %4995 = vmatprep.mubr.bf16.mxu0 %v4890
  %4996 = vmatmul.mubr.bf16.gmra.mrb[0].mxu0 %v4889
  %v4997 = vpop.f32.mrb[0].mxu0
  %v4998 = vadd.f32 0.0, %v4997
  %v4999 = vpop.f32.mrb[0].mxu0
  %v5000 = vpop.f32.mrb[0].mxu0
  %v5001 = vadd.f32 0.0, %v5000
  %v5002 = vpop.f32.mrb[0].mxu0
  %5003 = vmatprep.mubr.bf16.mxu0 %v4894
  %5004 = vmatmul.mubr.bf16.gmra.mrb[0].mxu0 %v4893
  %v5005 = vpop.f32.mrb[0].mxu0
  %v5006 = vadd.f32 0.0, %v5005
  %v5007 = vpop.f32.mrb[0].mxu0
  %v5008 = vpop.f32.mrb[0].mxu0
  %v5009 = vadd.f32 0.0, %v5008
  %v5010 = vpop.f32.mrb[0].mxu0
  %5011 = vmatprep.mubr.bf16.mxu0 %v4898
  %5012 = vmatmul.mubr.bf16.gmra.mrb[0].mxu0 %v4897
  %v5013 = vpop.f32.mrb[0].mxu0
  %v5014 = vadd.f32 0.0, %v5013
  %v5015 = vpop.f32.mrb[0].mxu0
  %v5016 = vpop.f32.mrb[0].mxu0
  %v5017 = vadd.f32 0.0, %v5016
  %v5018 = vpop.f32.mrb[0].mxu0
  %5019 = vmatprep.mubr.bf16.mxu0 %v4902
  %5020 = vmatmul.mubr.bf16.gmra.mrb[0].mxu0 %v4901
  %v5021 = vpop.f32.mrb[0].mxu0
  %v5022 = vadd.f32 0.0, %v5021
  %v5023 = vpop.f32.mrb[0].mxu0
  %v5024 = vpop.f32.mrb[0].mxu0
  %v5025 = vadd.f32 0.0, %v5024
  %v5026 = vpop.f32.mrb[0].mxu0
  %5027 = vmatprep.mubr.bf16.mxu0 %v4906
  %5028 = vmatmul.mubr.bf16.gmra.mrb[0].mxu0 %v4905
  %v5029 = vpop.f32.mrb[0].mxu0
  %v5030 = vadd.f32 0.0, %v5029
  %v5031 = vpop.f32.mrb[0].mxu0
  %v5032 = vpop.f32.mrb[0].mxu0
  %v5033 = vadd.f32 0.0, %v5032
  %v5034 = vpop.f32.mrb[0].mxu0
  %5035 = vmatprep.mubr.bf16.mxu0 %v4910
  %5036 = vmatmul.mubr.bf16.gmra.mrb[0].mxu0 %v4909
  %v5037 = vpop.f32.mrb[0].mxu0
  %v5038 = vadd.f32 0.0, %v5037
  %v5039 = vpop.f32.mrb[0].mxu0
  %v5040 = vpop.f32.mrb[0].mxu0
  %v5041 = vpop.f32.mrb[0].mxu0
  %5042 = vdwg.mxu0
  %5043 = vmatprep.subr.bf16.mxu0 0
  %5044 = vmatpush1.bf16.msra.mxu0 %v602
  %5045 = vmatprep.subr.bf16.mxu0 0
  %5046 = vmatpush1.bf16.msra.mxu0 %v603
  %5047 = vmatprep.subr.bf16.mxu0 0
  %5048 = vmatpush1.bf16.msra.mxu0 %v604
  %5049 = vmatprep.subr.bf16.mxu0 0
  %5050 = vmatpush1.bf16.msra.mxu0 %v605
  %5051 = vmatprep.subr.bf16.mxu0 0
  %5052 = vmatpush1.bf16.msra.mxu0 %v606
  %5053 = vmatprep.subr.bf16.mxu0 0
  %5054 = vmatpush1.bf16.msra.mxu0 %v607
  %5055 = vmatprep.subr.bf16.mxu0 0
  %5056 = vmatpush1.bf16.msra.mxu0 %v608
  %5057 = vmatprep.subr.bf16.mxu0 0
  %5058 = vmatpush1.bf16.msra.mxu0 %v609
  %5059 = vmatprep.subr.bf16.mxu0 0
  %5060 = vmatpush1.bf16.msra.mxu0 %v788
  %5061 = vmatprep.subr.bf16.mxu0 0
  %5062 = vmatpush1.bf16.msra.mxu0 0
  %5063 = vmatprep.subr.bf16.mxu0 0
  %5064 = vmatpush1.bf16.msra.mxu0 0
  %5065 = vmatprep.subr.bf16.mxu0 0
  %5066 = vmatpush1.bf16.msra.mxu0 0
  %5067 = vmatprep.subr.bf16.mxu0 0
  %5068 = vmatpush1.bf16.msra.mxu0 0
  %5069 = vmatprep.subr.bf16.mxu0 0
  %5070 = vmatpush1.bf16.msra.mxu0 0
  %5071 = vmatprep.subr.bf16.mxu0 0
  %5072 = vmatpush1.bf16.msra.mxu0 0
  %5073 = vmatprep.subr.bf16.mxu0 0
  %5074 = vmatpush1.bf16.msra.mxu0 0
  %5075 = vmatprep.mubr.bf16.mxu0 %v4935
  %5076 = vmatmul.mubr.bf16.gmra.mrb[0].mxu0 %v4887
  %v5077 = vpop.f32.mrb[0].mxu0
  %v5078 = vadd.f32 %v4990, %v5077
  %v5079 = vpop.f32.mrb[0].mxu0
  %v5080 = vpop.f32.mrb[0].mxu0
  %v5081 = vadd.f32 %v4993, %v5080
  %v5082 = vpop.f32.mrb[0].mxu0
  %5083 = vmatprep.mubr.bf16.mxu0 %v4938
  %5084 = vmatmul.mubr.bf16.gmra.mrb[0].mxu0 %v4891
  %v5085 = vpop.f32.mrb[0].mxu0
  %v5086 = vadd.f32 %v4998, %v5085
  %v5087 = vpop.f32.mrb[0].mxu0
  %v5088 = vpop.f32.mrb[0].mxu0
  %v5089 = vadd.f32 %v5001, %v5088
  %v5090 = vpop.f32.mrb[0].mxu0
  %5091 = vmatprep.mubr.bf16.mxu0 %v4941
  %5092 = vmatmul.mubr.bf16.gmra.mrb[0].mxu0 %v4895
  %v5093 = vpop.f32.mrb[0].mxu0
  %v5094 = vadd.f32 %v5006, %v5093
  %v5095 = vpop.f32.mrb[0].mxu0
  %v5096 = vpop.f32.mrb[0].mxu0
  %v5097 = vadd.f32 %v5009, %v5096
  %v5098 = vpop.f32.mrb[0].mxu0
  %5099 = vmatprep.mubr.bf16.mxu0 %v4944
  %5100 = vmatmul.mubr.bf16.gmra.mrb[0].mxu0 %v4899
  %v5101 = vpop.f32.mrb[0].mxu0
  %v5102 = vadd.f32 %v5014, %v5101
  %v5103 = vpop.f32.mrb[0].mxu0
  %v5104 = vpop.f32.mrb[0].mxu0
  %v5105 = vadd.f32 %v5017, %v5104
  %v5106 = vpop.f32.mrb[0].mxu0
  %5107 = vmatprep.mubr.bf16.mxu0 %v4947
  %5108 = vmatmul.mubr.bf16.gmra.mrb[0].mxu0 %v4903
  %v5109 = vpop.f32.mrb[0].mxu0
  %v5110 = vadd.f32 %v5022, %v5109
  %v5111 = vpop.f32.mrb[0].mxu0
  %v5112 = vpop.f32.mrb[0].mxu0
  %v5113 = vadd.f32 %v5025, %v5112
  %v5114 = vpop.f32.mrb[0].mxu0
  %5115 = vmatprep.mubr.bf16.mxu0 %v4950
  %5116 = vmatmul.mubr.bf16.gmra.mrb[0].mxu0 %v4907
  %v5117 = vpop.f32.mrb[0].mxu0
  %v5118 = vadd.f32 %v5030, %v5117
  %v5119 = vpop.f32.mrb[0].mxu0
  %v5120 = vpop.f32.mrb[0].mxu0
  %v5121 = vadd.f32 %v5033, %v5120
  %v5122 = vpop.f32.mrb[0].mxu0
  %5123 = vmatprep.mubr.bf16.mxu0 %v4953
  %5124 = vmatmul.mubr.bf16.gmra.mrb[0].mxu0 %v4911
  %v5125 = vpop.f32.mrb[0].mxu0
  %v5126 = vadd.f32 %v5038, %v5125
  %v5127 = vpop.f32.mrb[0].mxu0
  %v5128 = vpop.f32.mrb[0].mxu0
  %v5129 = vpop.f32.mrb[0].mxu0
  %5130 = vdwg.mxu0
  %v5131 = vpack.c.bf16 %v5081, %v5078
  %v5132 = vpack.c.bf16 %v5089, %v5086
  %v5133 = vpack.c.bf16 %v5097, %v5094
  %v5134 = vpack.c.bf16 %v5105, %v5102
  %v5135 = vpack.c.bf16 %v5113, %v5110
  %v5136 = vpack.c.bf16 %v5121, %v5118
  %v5137 = vpack.c.bf16 %v5126, %v5126
  %s5138 = scalar_lea.vmem %s4, 512
  %v5139 = vld [vmem:[%s5138] sm:$0xf]
  %v5140 = vld [vmem:[%s5138 + $0x4] sm:$0xf]
  %v5141 = vld [vmem:[%s5138 + $0x8] sm:$0xf]
  %v5142 = vld [vmem:[%s5138 + $0xc] sm:$0xf]
  %v5143 = vld [vmem:[%s5138 + $0x10] sm:$0xf]
  %v5144 = vld [vmem:[%s5138 + $0x14] sm:$0xf]
  %v5145 = vld [vmem:[%s5138 + $0x18] sm:$0xf]
  %v5146 = vld [vmem:[%s5138 + $0x1c] sm:$0xf]
  %v5147 = vld [vmem:[%s5138 + $0x20] sm:$0xf]
  %v5148 = vld [vmem:[%s5138 + $0x24] sm:$0xf]
  %v5149 = vld [vmem:[%s5138 + $0x28] sm:$0xf]
  %v5150 = vld [vmem:[%s5138 + $0x2c] sm:$0xf]
  %v5151 = vld [vmem:[%s5138 + $0x30] sm:$0xf]
  %v5152 = vld [vmem:[%s5138 + $0x34] sm:$0xf]
  %v5153 = vld [vmem:[%s5138 + $0x38] sm:$0xf]
  %v5154 = vld [vmem:[%s5138 + $0x3c] sm:$0xf]
  %v5171 = vunpack.c.l.b16 %v5139
  %v5172 = vunpack.c.l.b16 %v5140
  %v5173 = vunpack.c.l.b16 %v5141
  %v5174 = vunpack.c.l.b16 %v5142
  %v5175 = vunpack.c.l.b16 %v5143
  %v5176 = vunpack.c.l.b16 %v5144
  %v5177 = vunpack.c.l.b16 %v5145
  %v5178 = vunpack.c.l.b16 %v5146
  %v5179 = vunpack.c.l.b16 %v5147
  %v5180 = vunpack.c.l.b16 %v5148
  %v5181 = vunpack.c.l.b16 %v5149
  %v5182 = vunpack.c.l.b16 %v5150
  %v5183 = vunpack.c.l.b16 %v5151
  %v5184 = vunpack.c.l.b16 %v5152
  %v5185 = vunpack.c.l.b16 %v5153
  %v5186 = vunpack.c.l.b16 %v5154
  %v5187 = vpack.c.b16 %v5172, %v5171
  %v5188 = vpack.c.b16 %v5174, %v5173
  %v5189 = vpack.c.b16 %v5176, %v5175
  %v5190 = vpack.c.b16 %v5178, %v5177
  %v5191 = vpack.c.b16 %v5180, %v5179
  %v5192 = vpack.c.b16 %v5182, %v5181
  %v5193 = vpack.c.b16 %v5184, %v5183
  %v5194 = vpack.c.b16 %v5186, %v5185
  %5203 = vmatprep.subr.bf16.mxu0 0
  %5204 = vmatpush1.bf16.msra.mxu0 %v5187
  %5205 = vmatprep.subr.bf16.mxu0 0
  %5206 = vmatpush1.bf16.msra.mxu0 %v5188
  %5207 = vmatprep.subr.bf16.mxu0 0
  %5208 = vmatpush1.bf16.msra.mxu0 %v5189
  %5209 = vmatprep.subr.bf16.mxu0 0
  %5210 = vmatpush1.bf16.msra.mxu0 %v5190
  %5211 = vmatprep.subr.bf16.mxu0 0
  %5212 = vmatpush1.bf16.msra.mxu0 %v5191
  %5213 = vmatprep.subr.bf16.mxu0 0
  %5214 = vmatpush1.bf16.msra.mxu0 %v5192
  %5215 = vmatprep.subr.bf16.mxu0 0
  %5216 = vmatpush1.bf16.msra.mxu0 %v5193
  %5217 = vmatprep.subr.bf16.mxu0 0
  %5218 = vmatpush1.bf16.msra.mxu0 %v5194
  %5219 = vmatprep.subr.bf16.mxu0 0
  %5220 = vmatpush1.bf16.msra.mxu0 0
  %5221 = vmatprep.subr.bf16.mxu0 0
  %5222 = vmatpush1.bf16.msra.mxu0 0
  %5223 = vmatprep.subr.bf16.mxu0 0
  %5224 = vmatpush1.bf16.msra.mxu0 0
  %5225 = vmatprep.subr.bf16.mxu0 0
  %5226 = vmatpush1.bf16.msra.mxu0 0
  %5227 = vmatprep.subr.bf16.mxu0 0
  %5228 = vmatpush1.bf16.msra.mxu0 0
  %5229 = vmatprep.subr.bf16.mxu0 0
  %5230 = vmatpush1.bf16.msra.mxu0 0
  %5231 = vmatprep.subr.bf16.mxu0 0
  %5232 = vmatpush1.bf16.msra.mxu0 0
  %5233 = vmatprep.subr.bf16.mxu0 0
  %5234 = vmatpush1.bf16.msra.mxu0 0
  %5235 = vmatprep.mubr.bf16.mxu0 0
  %5236 = vmatmul.mubr.bf16.gmra.mrb[0].mxu0 %v5131
  %v5237 = vpop.f32.mrb[0].mxu0
  %v5238 = vadd.f32 0.0, %v5237
  %v5239 = vpop.f32.mrb[0].mxu0
  %v5240 = vpop.f32.mrb[0].mxu0
  %v5241 = vadd.f32 0.0, %v5240
  %v5242 = vpop.f32.mrb[0].mxu0
  %5243 = vmatprep.mubr.bf16.mxu0 0
  %5244 = vmatmul.mubr.bf16.gmra.mrb[0].mxu0 %v5132
  %v5245 = vpop.f32.mrb[0].mxu0
  %v5246 = vadd.f32 0.0, %v5245
  %v5247 = vpop.f32.mrb[0].mxu0
  %v5248 = vpop.f32.mrb[0].mxu0
  %v5249 = vadd.f32 0.0, %v5248
  %v5250 = vpop.f32.mrb[0].mxu0
  %5251 = vmatprep.mubr.bf16.mxu0 0
  %5252 = vmatmul.mubr.bf16.gmra.mrb[0].mxu0 %v5133
  %v5253 = vpop.f32.mrb[0].mxu0
  %v5254 = vadd.f32 0.0, %v5253
  %v5255 = vpop.f32.mrb[0].mxu0
  %v5256 = vpop.f32.mrb[0].mxu0
  %v5257 = vadd.f32 0.0, %v5256
  %v5258 = vpop.f32.mrb[0].mxu0
  %5259 = vmatprep.mubr.bf16.mxu0 0
  %5260 = vmatmul.mubr.bf16.gmra.mrb[0].mxu0 %v5134
  %v5261 = vpop.f32.mrb[0].mxu0
  %v5262 = vadd.f32 0.0, %v5261
  %v5263 = vpop.f32.mrb[0].mxu0
  %v5264 = vpop.f32.mrb[0].mxu0
  %v5265 = vadd.f32 0.0, %v5264
  %v5266 = vpop.f32.mrb[0].mxu0
  %5267 = vmatprep.mubr.bf16.mxu0 0
  %5268 = vmatmul.mubr.bf16.gmra.mrb[0].mxu0 %v5135
  %v5269 = vpop.f32.mrb[0].mxu0
  %v5270 = vadd.f32 0.0, %v5269
  %v5271 = vpop.f32.mrb[0].mxu0
  %v5272 = vpop.f32.mrb[0].mxu0
  %v5273 = vadd.f32 0.0, %v5272
  %v5274 = vpop.f32.mrb[0].mxu0
  %5275 = vmatprep.mubr.bf16.mxu0 0
  %5276 = vmatmul.mubr.bf16.gmra.mrb[0].mxu0 %v5136
  %v5277 = vpop.f32.mrb[0].mxu0
  %v5278 = vadd.f32 0.0, %v5277
  %v5279 = vpop.f32.mrb[0].mxu0
  %v5280 = vpop.f32.mrb[0].mxu0
  %v5281 = vadd.f32 0.0, %v5280
  %v5282 = vpop.f32.mrb[0].mxu0
  %5283 = vmatprep.mubr.bf16.mxu0 0
  %5284 = vmatmul.mubr.bf16.gmra.mrb[0].mxu0 %v5137
  %v5285 = vpop.f32.mrb[0].mxu0
  %v5286 = vadd.f32 0.0, %v5285
  %v5287 = vpop.f32.mrb[0].mxu0
  %v5288 = vpop.f32.mrb[0].mxu0
  %v5289 = vpop.f32.mrb[0].mxu0
  %5290 = vdwg.mxu0
  %v5291 = vadd.f32 %v4767, %v5238
  %v5292 = vadd.f32 %v4768, %v5241
  %v5293 = vadd.f32 %v4769, %v5246
  %v5294 = vadd.f32 %v4770, %v5249
  %v5295 = vadd.f32 %v4771, %v5254
  %v5296 = vadd.f32 %v4772, %v5257
  %v5297 = vadd.f32 %v4773, %v5262
  %v5298 = vadd.f32 %v4774, %v5265
  %v5299 = vadd.f32 %v4775, %v5270
  %v5300 = vadd.f32 %v4776, %v5273
  %v5301 = vadd.f32 %v4777, %v5278
  %v5302 = vadd.f32 %v4778, %v5281
  %v5303 = vadd.f32 %v4779, %v5286
  %s5304 = scalar_lea.vmem %s3, 1872
  %v5305 = vld [vmem:[%s5304] sm:$0xff]
  %v5306 = vld [vmem:[%s5304 + $0x8] sm:$0xff]
  %v5307 = vld [vmem:[%s5304 + $0x10] sm:$0xff]
  %v5308 = vld [vmem:[%s5304 + $0x18] sm:$0xff]
  %v5309 = vld [vmem:[%s5304 + $0x20] sm:$0xff]
  %v5310 = vld [vmem:[%s5304 + $0x28] sm:$0xff]
  %v5311 = vld [vmem:[%s5304 + $0x30] sm:$0xff]
  %v5312 = vld [vmem:[%s5304 + $0x38] sm:$0xff]
  %v5313 = vld [vmem:[%s5304 + $0x40] sm:$0xff]
  %v5314 = vld [vmem:[%s5304 + $0x48] sm:$0xff]
  %v5315 = vld [vmem:[%s5304 + $0x50] sm:$0xff]
  %v5316 = vld [vmem:[%s5304 + $0x58] sm:$0xff]
  %v5317 = vld [vmem:[%s5304 + $0x60] sm:$0xff]
  %v5318 = vld [vmem:[%s5304 + $0x68] sm:$0xff]
  %v5319 = vld [vmem:[%s5304 + $0x70] sm:$0xff]
  %v5320 = vld [vmem:[%s5304 + $0x78] sm:$0xff]
  %v5321 = vld [vmem:[%s5304 + $0x80] sm:$0xff]
  %v5322 = vld [vmem:[%s5304 + $0x88] sm:$0xff]
  %v5323 = vld [vmem:[%s5304 + $0x90] sm:$0xff]
  %v5324 = vld [vmem:[%s5304 + $0x98] sm:$0xff]
  %v5325 = vld [vmem:[%s5304 + $0xa0] sm:$0xff]
  %v5326 = vld [vmem:[%s5304 + $0xa8] sm:$0xff]
  %v5327 = vld [vmem:[%s5304 + $0xb0] sm:$0xff]
  %v5328 = vld [vmem:[%s5304 + $0xb8] sm:$0xff]
  %v5329 = vld [vmem:[%s5304 + $0xc0] sm:$0xff]
  %v5330 = vld [vmem:[%s5304 + $0xc8] sm:$0xff]
  %v5357 = vunpack.c.l.b16 %v5305
  %v5358 = vunpack.c.h.b16 %v5305
  %v5359 = vunpack.c.l.b16 %v5306
  %v5360 = vunpack.c.h.b16 %v5306
  %v5361 = vunpack.c.l.b16 %v5307
  %v5362 = vunpack.c.h.b16 %v5307
  %v5363 = vunpack.c.l.b16 %v5308
  %v5364 = vunpack.c.h.b16 %v5308
  %v5365 = vunpack.c.l.b16 %v5309
  %v5366 = vunpack.c.h.b16 %v5309
  %v5367 = vunpack.c.l.b16 %v5310
  %v5368 = vunpack.c.h.b16 %v5310
  %v5369 = vunpack.c.l.b16 %v5311
  %v5370 = vunpack.c.h.b16 %v5311
  %v5371 = vunpack.c.l.b16 %v5312
  %v5372 = vunpack.c.h.b16 %v5312
  %v5373 = vunpack.c.l.b16 %v5313
  %v5374 = vunpack.c.h.b16 %v5313
  %v5375 = vunpack.c.l.b16 %v5314
  %v5376 = vunpack.c.h.b16 %v5314
  %v5377 = vunpack.c.l.b16 %v5315
  %v5378 = vunpack.c.h.b16 %v5315
  %v5379 = vunpack.c.l.b16 %v5316
  %v5380 = vunpack.c.h.b16 %v5316
  %v5381 = vunpack.c.l.b16 %v5317
  %v5382 = vunpack.c.h.b16 %v5317
  %v5383 = vunpack.c.l.b16 %v5318
  %v5384 = vunpack.c.h.b16 %v5318
  %v5385 = vunpack.c.l.b16 %v5319
  %v5386 = vunpack.c.h.b16 %v5319
  %v5387 = vunpack.c.l.b16 %v5320
  %v5388 = vunpack.c.h.b16 %v5320
  %v5389 = vunpack.c.l.b16 %v5321
  %v5390 = vunpack.c.h.b16 %v5321
  %v5391 = vunpack.c.l.b16 %v5322
  %v5392 = vunpack.c.h.b16 %v5322
  %v5393 = vunpack.c.l.b16 %v5323
  %v5394 = vunpack.c.h.b16 %v5323
  %v5395 = vunpack.c.l.b16 %v5324
  %v5396 = vunpack.c.h.b16 %v5324
  %v5397 = vunpack.c.l.b16 %v5325
  %v5398 = vunpack.c.h.b16 %v5325
  %v5399 = vunpack.c.l.b16 %v5326
  %v5400 = vunpack.c.h.b16 %v5326
  %v5401 = vunpack.c.l.b16 %v5327
  %v5402 = vunpack.c.h.b16 %v5327
  %v5403 = vunpack.c.l.b16 %v5328
  %v5404 = vunpack.c.h.b16 %v5328
  %v5405 = vunpack.c.l.b16 %v5329
  %v5406 = vunpack.c.h.b16 %v5329
  %v5407 = vunpack.c.l.b16 %v5330
  %v5408 = vunpack.c.h.b16 %v5330
  %v5409 = vpack.c.b16 %v5361, %v5357
  %v5410 = vpack.c.b16 %v5362, %v5358
  %v5411 = vpack.c.b16 %v5363, %v5359
  %v5412 = vpack.c.b16 %v5364, %v5360
  %v5413 = vpack.c.b16 %v5369, %v5365
  %v5414 = vpack.c.b16 %v5370, %v5366
  %v5415 = vpack.c.b16 %v5371, %v5367
  %v5416 = vpack.c.b16 %v5372, %v5368
  %v5417 = vpack.c.b16 %v5377, %v5373
  %v5418 = vpack.c.b16 %v5378, %v5374
  %v5419 = vpack.c.b16 %v5379, %v5375
  %v5420 = vpack.c.b16 %v5380, %v5376
  %v5421 = vpack.c.b16 %v5385, %v5381
  %v5422 = vpack.c.b16 %v5386, %v5382
  %v5423 = vpack.c.b16 %v5387, %v5383
  %v5424 = vpack.c.b16 %v5388, %v5384
  %v5425 = vpack.c.b16 %v5393, %v5389
  %v5426 = vpack.c.b16 %v5394, %v5390
  %v5427 = vpack.c.b16 %v5395, %v5391
  %v5428 = vpack.c.b16 %v5396, %v5392
  %v5429 = vpack.c.b16 %v5401, %v5397
  %v5430 = vpack.c.b16 %v5402, %v5398
  %v5431 = vpack.c.b16 %v5403, %v5399
  %v5432 = vpack.c.b16 %v5404, %v5400
  %v5433 = vpack.c.b16 %v5405, %v5405
  %v5434 = vpack.c.b16 %v5406, %v5406
  %v5435 = vpack.c.b16 %v5407, %v5407
  %v5436 = vpack.c.b16 %v5408, %v5408
  %v5459 = vsel %vm764, %v5412, 0
  %v5462 = vsel %vm764, %v5416, 0
  %v5465 = vsel %vm764, %v5420, 0
  %v5468 = vsel %vm764, %v5424, 0
  %v5471 = vsel %vm764, %v5428, 0
  %v5474 = vsel %vm764, %v5432, 0
  %v5477 = vsel %vm764, %v5436, 0
  %5479 = vmatprep.subr.bf16.mxu0 0
  %5480 = vmatpush1.bf16.msra.mxu0 %v586
  %5481 = vmatprep.subr.bf16.mxu0 0
  %5482 = vmatpush1.bf16.msra.mxu0 %v587
  %5483 = vmatprep.subr.bf16.mxu0 0
  %5484 = vmatpush1.bf16.msra.mxu0 %v588
  %5485 = vmatprep.subr.bf16.mxu0 0
  %5486 = vmatpush1.bf16.msra.mxu0 %v589
  %5487 = vmatprep.subr.bf16.mxu0 0
  %5488 = vmatpush1.bf16.msra.mxu0 %v590
  %5489 = vmatprep.subr.bf16.mxu0 0
  %5490 = vmatpush1.bf16.msra.mxu0 %v591
  %5491 = vmatprep.subr.bf16.mxu0 0
  %5492 = vmatpush1.bf16.msra.mxu0 %v592
  %5493 = vmatprep.subr.bf16.mxu0 0
  %5494 = vmatpush1.bf16.msra.mxu0 %v593
  %5495 = vmatprep.subr.bf16.mxu0 0
  %5496 = vmatpush1.bf16.msra.mxu0 %v594
  %5497 = vmatprep.subr.bf16.mxu0 0
  %5498 = vmatpush1.bf16.msra.mxu0 %v595
  %5499 = vmatprep.subr.bf16.mxu0 0
  %5500 = vmatpush1.bf16.msra.mxu0 %v596
  %5501 = vmatprep.subr.bf16.mxu0 0
  %5502 = vmatpush1.bf16.msra.mxu0 %v597
  %5503 = vmatprep.subr.bf16.mxu0 0
  %5504 = vmatpush1.bf16.msra.mxu0 %v598
  %5505 = vmatprep.subr.bf16.mxu0 0
  %5506 = vmatpush1.bf16.msra.mxu0 %v599
  %5507 = vmatprep.subr.bf16.mxu0 0
  %5508 = vmatpush1.bf16.msra.mxu0 %v600
  %5509 = vmatprep.subr.bf16.mxu0 0
  %5510 = vmatpush1.bf16.msra.mxu0 %v601
  %5511 = vmatprep.mubr.bf16.mxu0 %v5410
  %5512 = vmatmul.mubr.bf16.gmra.mrb[0].mxu0 %v5409
  %v5513 = vpop.f32.mrb[0].mxu0
  %v5514 = vadd.f32 0.0, %v5513
  %v5515 = vpop.f32.mrb[0].mxu0
  %v5516 = vpop.f32.mrb[0].mxu0
  %v5517 = vadd.f32 0.0, %v5516
  %v5518 = vpop.f32.mrb[0].mxu0
  %5519 = vmatprep.mubr.bf16.mxu0 %v5414
  %5520 = vmatmul.mubr.bf16.gmra.mrb[0].mxu0 %v5413
  %v5521 = vpop.f32.mrb[0].mxu0
  %v5522 = vadd.f32 0.0, %v5521
  %v5523 = vpop.f32.mrb[0].mxu0
  %v5524 = vpop.f32.mrb[0].mxu0
  %v5525 = vadd.f32 0.0, %v5524
  %v5526 = vpop.f32.mrb[0].mxu0
  %5527 = vmatprep.mubr.bf16.mxu0 %v5418
  %5528 = vmatmul.mubr.bf16.gmra.mrb[0].mxu0 %v5417
  %v5529 = vpop.f32.mrb[0].mxu0
  %v5530 = vadd.f32 0.0, %v5529
  %v5531 = vpop.f32.mrb[0].mxu0
  %v5532 = vpop.f32.mrb[0].mxu0
  %v5533 = vadd.f32 0.0, %v5532
  %v5534 = vpop.f32.mrb[0].mxu0
  %5535 = vmatprep.mubr.bf16.mxu0 %v5422
  %5536 = vmatmul.mubr.bf16.gmra.mrb[0].mxu0 %v5421
  %v5537 = vpop.f32.mrb[0].mxu0
  %v5538 = vadd.f32 0.0, %v5537
  %v5539 = vpop.f32.mrb[0].mxu0
  %v5540 = vpop.f32.mrb[0].mxu0
  %v5541 = vadd.f32 0.0, %v5540
  %v5542 = vpop.f32.mrb[0].mxu0
  %5543 = vmatprep.mubr.bf16.mxu0 %v5426
  %5544 = vmatmul.mubr.bf16.gmra.mrb[0].mxu0 %v5425
  %v5545 = vpop.f32.mrb[0].mxu0
  %v5546 = vadd.f32 0.0, %v5545
  %v5547 = vpop.f32.mrb[0].mxu0
  %v5548 = vpop.f32.mrb[0].mxu0
  %v5549 = vadd.f32 0.0, %v5548
  %v5550 = vpop.f32.mrb[0].mxu0
  %5551 = vmatprep.mubr.bf16.mxu0 %v5430
  %5552 = vmatmul.mubr.bf16.gmra.mrb[0].mxu0 %v5429
  %v5553 = vpop.f32.mrb[0].mxu0
  %v5554 = vadd.f32 0.0, %v5553
  %v5555 = vpop.f32.mrb[0].mxu0
  %v5556 = vpop.f32.mrb[0].mxu0
  %v5557 = vadd.f32 0.0, %v5556
  %v5558 = vpop.f32.mrb[0].mxu0
  %5559 = vmatprep.mubr.bf16.mxu0 %v5434
  %5560 = vmatmul.mubr.bf16.gmra.mrb[0].mxu0 %v5433
  %v5561 = vpop.f32.mrb[0].mxu0
  %v5562 = vadd.f32 0.0, %v5561
  %v5563 = vpop.f32.mrb[0].mxu0
  %v5564 = vpop.f32.mrb[0].mxu0
  %v5565 = vpop.f32.mrb[0].mxu0
  %5566 = vdwg.mxu0
  %5567 = vmatprep.subr.bf16.mxu0 0
  %5568 = vmatpush1.bf16.msra.mxu0 %v602
  %5569 = vmatprep.subr.bf16.mxu0 0
  %5570 = vmatpush1.bf16.msra.mxu0 %v603
  %5571 = vmatprep.subr.bf16.mxu0 0
  %5572 = vmatpush1.bf16.msra.mxu0 %v604
  %5573 = vmatprep.subr.bf16.mxu0 0
  %5574 = vmatpush1.bf16.msra.mxu0 %v605
  %5575 = vmatprep.subr.bf16.mxu0 0
  %5576 = vmatpush1.bf16.msra.mxu0 %v606
  %5577 = vmatprep.subr.bf16.mxu0 0
  %5578 = vmatpush1.bf16.msra.mxu0 %v607
  %5579 = vmatprep.subr.bf16.mxu0 0
  %5580 = vmatpush1.bf16.msra.mxu0 %v608
  %5581 = vmatprep.subr.bf16.mxu0 0
  %5582 = vmatpush1.bf16.msra.mxu0 %v609
  %5583 = vmatprep.subr.bf16.mxu0 0
  %5584 = vmatpush1.bf16.msra.mxu0 %v788
  %5585 = vmatprep.subr.bf16.mxu0 0
  %5586 = vmatpush1.bf16.msra.mxu0 0
  %5587 = vmatprep.subr.bf16.mxu0 0
  %5588 = vmatpush1.bf16.msra.mxu0 0
  %5589 = vmatprep.subr.bf16.mxu0 0
  %5590 = vmatpush1.bf16.msra.mxu0 0
  %5591 = vmatprep.subr.bf16.mxu0 0
  %5592 = vmatpush1.bf16.msra.mxu0 0
  %5593 = vmatprep.subr.bf16.mxu0 0
  %5594 = vmatpush1.bf16.msra.mxu0 0
  %5595 = vmatprep.subr.bf16.mxu0 0
  %5596 = vmatpush1.bf16.msra.mxu0 0
  %5597 = vmatprep.subr.bf16.mxu0 0
  %5598 = vmatpush1.bf16.msra.mxu0 0
  %5599 = vmatprep.mubr.bf16.mxu0 %v5459
  %5600 = vmatmul.mubr.bf16.gmra.mrb[0].mxu0 %v5411
  %v5601 = vpop.f32.mrb[0].mxu0
  %v5602 = vadd.f32 %v5514, %v5601
  %v5603 = vpop.f32.mrb[0].mxu0
  %v5604 = vpop.f32.mrb[0].mxu0
  %v5605 = vadd.f32 %v5517, %v5604
  %v5606 = vpop.f32.mrb[0].mxu0
  %5607 = vmatprep.mubr.bf16.mxu0 %v5462
  %5608 = vmatmul.mubr.bf16.gmra.mrb[0].mxu0 %v5415
  %v5609 = vpop.f32.mrb[0].mxu0
  %v5610 = vadd.f32 %v5522, %v5609
  %v5611 = vpop.f32.mrb[0].mxu0
  %v5612 = vpop.f32.mrb[0].mxu0
  %v5613 = vadd.f32 %v5525, %v5612
  %v5614 = vpop.f32.mrb[0].mxu0
  %5615 = vmatprep.mubr.bf16.mxu0 %v5465
  %5616 = vmatmul.mubr.bf16.gmra.mrb[0].mxu0 %v5419
  %v5617 = vpop.f32.mrb[0].mxu0
  %v5618 = vadd.f32 %v5530, %v5617
  %v5619 = vpop.f32.mrb[0].mxu0
  %v5620 = vpop.f32.mrb[0].mxu0
  %v5621 = vadd.f32 %v5533, %v5620
  %v5622 = vpop.f32.mrb[0].mxu0
  %5623 = vmatprep.mubr.bf16.mxu0 %v5468
  %5624 = vmatmul.mubr.bf16.gmra.mrb[0].mxu0 %v5423
  %v5625 = vpop.f32.mrb[0].mxu0
  %v5626 = vadd.f32 %v5538, %v5625
  %v5627 = vpop.f32.mrb[0].mxu0
  %v5628 = vpop.f32.mrb[0].mxu0
  %v5629 = vadd.f32 %v5541, %v5628
  %v5630 = vpop.f32.mrb[0].mxu0
  %5631 = vmatprep.mubr.bf16.mxu0 %v5471
  %5632 = vmatmul.mubr.bf16.gmra.mrb[0].mxu0 %v5427
  %v5633 = vpop.f32.mrb[0].mxu0
  %v5634 = vadd.f32 %v5546, %v5633
  %v5635 = vpop.f32.mrb[0].mxu0
  %v5636 = vpop.f32.mrb[0].mxu0
  %v5637 = vadd.f32 %v5549, %v5636
  %v5638 = vpop.f32.mrb[0].mxu0
  %5639 = vmatprep.mubr.bf16.mxu0 %v5474
  %5640 = vmatmul.mubr.bf16.gmra.mrb[0].mxu0 %v5431
  %v5641 = vpop.f32.mrb[0].mxu0
  %v5642 = vadd.f32 %v5554, %v5641
  %v5643 = vpop.f32.mrb[0].mxu0
  %v5644 = vpop.f32.mrb[0].mxu0
  %v5645 = vadd.f32 %v5557, %v5644
  %v5646 = vpop.f32.mrb[0].mxu0
  %5647 = vmatprep.mubr.bf16.mxu0 %v5477
  %5648 = vmatmul.mubr.bf16.gmra.mrb[0].mxu0 %v5435
  %v5649 = vpop.f32.mrb[0].mxu0
  %v5650 = vadd.f32 %v5562, %v5649
  %v5651 = vpop.f32.mrb[0].mxu0
  %v5652 = vpop.f32.mrb[0].mxu0
  %v5653 = vpop.f32.mrb[0].mxu0
  %5654 = vdwg.mxu0
  %v5655 = vpack.c.bf16 %v5605, %v5602
  %v5656 = vpack.c.bf16 %v5613, %v5610
  %v5657 = vpack.c.bf16 %v5621, %v5618
  %v5658 = vpack.c.bf16 %v5629, %v5626
  %v5659 = vpack.c.bf16 %v5637, %v5634
  %v5660 = vpack.c.bf16 %v5645, %v5642
  %v5661 = vpack.c.bf16 %v5650, %v5650
  %s5662 = scalar_lea.vmem %s4, 576
  %v5663 = vld [vmem:[%s5662] sm:$0xf]
  %v5664 = vld [vmem:[%s5662 + $0x4] sm:$0xf]
  %v5665 = vld [vmem:[%s5662 + $0x8] sm:$0xf]
  %v5666 = vld [vmem:[%s5662 + $0xc] sm:$0xf]
  %v5667 = vld [vmem:[%s5662 + $0x10] sm:$0xf]
  %v5668 = vld [vmem:[%s5662 + $0x14] sm:$0xf]
  %v5669 = vld [vmem:[%s5662 + $0x18] sm:$0xf]
  %v5670 = vld [vmem:[%s5662 + $0x1c] sm:$0xf]
  %v5671 = vld [vmem:[%s5662 + $0x20] sm:$0xf]
  %v5672 = vld [vmem:[%s5662 + $0x24] sm:$0xf]
  %v5673 = vld [vmem:[%s5662 + $0x28] sm:$0xf]
  %v5674 = vld [vmem:[%s5662 + $0x2c] sm:$0xf]
  %v5675 = vld [vmem:[%s5662 + $0x30] sm:$0xf]
  %v5676 = vld [vmem:[%s5662 + $0x34] sm:$0xf]
  %v5677 = vld [vmem:[%s5662 + $0x38] sm:$0xf]
  %v5678 = vld [vmem:[%s5662 + $0x3c] sm:$0xf]
  %v5695 = vunpack.c.l.b16 %v5663
  %v5696 = vunpack.c.l.b16 %v5664
  %v5697 = vunpack.c.l.b16 %v5665
  %v5698 = vunpack.c.l.b16 %v5666
  %v5699 = vunpack.c.l.b16 %v5667
  %v5700 = vunpack.c.l.b16 %v5668
  %v5701 = vunpack.c.l.b16 %v5669
  %v5702 = vunpack.c.l.b16 %v5670
  %v5703 = vunpack.c.l.b16 %v5671
  %v5704 = vunpack.c.l.b16 %v5672
  %v5705 = vunpack.c.l.b16 %v5673
  %v5706 = vunpack.c.l.b16 %v5674
  %v5707 = vunpack.c.l.b16 %v5675
  %v5708 = vunpack.c.l.b16 %v5676
  %v5709 = vunpack.c.l.b16 %v5677
  %v5710 = vunpack.c.l.b16 %v5678
  %v5711 = vpack.c.b16 %v5696, %v5695
  %v5712 = vpack.c.b16 %v5698, %v5697
  %v5713 = vpack.c.b16 %v5700, %v5699
  %v5714 = vpack.c.b16 %v5702, %v5701
  %v5715 = vpack.c.b16 %v5704, %v5703
  %v5716 = vpack.c.b16 %v5706, %v5705
  %v5717 = vpack.c.b16 %v5708, %v5707
  %v5718 = vpack.c.b16 %v5710, %v5709
  %5727 = vmatprep.subr.bf16.mxu0 0
  %5728 = vmatpush1.bf16.msra.mxu0 %v5711
  %5729 = vmatprep.subr.bf16.mxu0 0
  %5730 = vmatpush1.bf16.msra.mxu0 %v5712
  %5731 = vmatprep.subr.bf16.mxu0 0
  %5732 = vmatpush1.bf16.msra.mxu0 %v5713
  %5733 = vmatprep.subr.bf16.mxu0 0
  %5734 = vmatpush1.bf16.msra.mxu0 %v5714
  %5735 = vmatprep.subr.bf16.mxu0 0
  %5736 = vmatpush1.bf16.msra.mxu0 %v5715
  %5737 = vmatprep.subr.bf16.mxu0 0
  %5738 = vmatpush1.bf16.msra.mxu0 %v5716
  %5739 = vmatprep.subr.bf16.mxu0 0
  %5740 = vmatpush1.bf16.msra.mxu0 %v5717
  %5741 = vmatprep.subr.bf16.mxu0 0
  %5742 = vmatpush1.bf16.msra.mxu0 %v5718
  %5743 = vmatprep.subr.bf16.mxu0 0
  %5744 = vmatpush1.bf16.msra.mxu0 0
  %5745 = vmatprep.subr.bf16.mxu0 0
  %5746 = vmatpush1.bf16.msra.mxu0 0
  %5747 = vmatprep.subr.bf16.mxu0 0
  %5748 = vmatpush1.bf16.msra.mxu0 0
  %5749 = vmatprep.subr.bf16.mxu0 0
  %5750 = vmatpush1.bf16.msra.mxu0 0
  %5751 = vmatprep.subr.bf16.mxu0 0
  %5752 = vmatpush1.bf16.msra.mxu0 0
  %5753 = vmatprep.subr.bf16.mxu0 0
  %5754 = vmatpush1.bf16.msra.mxu0 0
  %5755 = vmatprep.subr.bf16.mxu0 0
  %5756 = vmatpush1.bf16.msra.mxu0 0
  %5757 = vmatprep.subr.bf16.mxu0 0
  %5758 = vmatpush1.bf16.msra.mxu0 0
  %5759 = vmatprep.mubr.bf16.mxu0 0
  %5760 = vmatmul.mubr.bf16.gmra.mrb[0].mxu0 %v5655
  %v5761 = vpop.f32.mrb[0].mxu0
  %v5762 = vadd.f32 0.0, %v5761
  %v5763 = vpop.f32.mrb[0].mxu0
  %v5764 = vpop.f32.mrb[0].mxu0
  %v5765 = vadd.f32 0.0, %v5764
  %v5766 = vpop.f32.mrb[0].mxu0
  %5767 = vmatprep.mubr.bf16.mxu0 0
  %5768 = vmatmul.mubr.bf16.gmra.mrb[0].mxu0 %v5656
  %v5769 = vpop.f32.mrb[0].mxu0
  %v5770 = vadd.f32 0.0, %v5769
  %v5771 = vpop.f32.mrb[0].mxu0
  %v5772 = vpop.f32.mrb[0].mxu0
  %v5773 = vadd.f32 0.0, %v5772
  %v5774 = vpop.f32.mrb[0].mxu0
  %5775 = vmatprep.mubr.bf16.mxu0 0
  %5776 = vmatmul.mubr.bf16.gmra.mrb[0].mxu0 %v5657
  %v5777 = vpop.f32.mrb[0].mxu0
  %v5778 = vadd.f32 0.0, %v5777
  %v5779 = vpop.f32.mrb[0].mxu0
  %v5780 = vpop.f32.mrb[0].mxu0
  %v5781 = vadd.f32 0.0, %v5780
  %v5782 = vpop.f32.mrb[0].mxu0
  %5783 = vmatprep.mubr.bf16.mxu0 0
  %5784 = vmatmul.mubr.bf16.gmra.mrb[0].mxu0 %v5658
  %v5785 = vpop.f32.mrb[0].mxu0
  %v5786 = vadd.f32 0.0, %v5785
  %v5787 = vpop.f32.mrb[0].mxu0
  %v5788 = vpop.f32.mrb[0].mxu0
  %v5789 = vadd.f32 0.0, %v5788
  %v5790 = vpop.f32.mrb[0].mxu0
  %5791 = vmatprep.mubr.bf16.mxu0 0
  %5792 = vmatmul.mubr.bf16.gmra.mrb[0].mxu0 %v5659
  %v5793 = vpop.f32.mrb[0].mxu0
  %v5794 = vadd.f32 0.0, %v5793
  %v5795 = vpop.f32.mrb[0].mxu0
  %v5796 = vpop.f32.mrb[0].mxu0
  %v5797 = vadd.f32 0.0, %v5796
  %v5798 = vpop.f32.mrb[0].mxu0
  %5799 = vmatprep.mubr.bf16.mxu0 0
  %5800 = vmatmul.mubr.bf16.gmra.mrb[0].mxu0 %v5660
  %v5801 = vpop.f32.mrb[0].mxu0
  %v5802 = vadd.f32 0.0, %v5801
  %v5803 = vpop.f32.mrb[0].mxu0
  %v5804 = vpop.f32.mrb[0].mxu0
  %v5805 = vadd.f32 0.0, %v5804
  %v5806 = vpop.f32.mrb[0].mxu0
  %5807 = vmatprep.mubr.bf16.mxu0 0
  %5808 = vmatmul.mubr.bf16.gmra.mrb[0].mxu0 %v5661
  %v5809 = vpop.f32.mrb[0].mxu0
  %v5810 = vadd.f32 0.0, %v5809
  %v5811 = vpop.f32.mrb[0].mxu0
  %v5812 = vpop.f32.mrb[0].mxu0
  %v5813 = vpop.f32.mrb[0].mxu0
  %5814 = vdwg.mxu0
  %v5815 = vadd.f32 %v5291, %v5762
  %v5816 = vadd.f32 %v5292, %v5765
  %v5817 = vadd.f32 %v5293, %v5770
  %v5818 = vadd.f32 %v5294, %v5773
  %v5819 = vadd.f32 %v5295, %v5778
  %v5820 = vadd.f32 %v5296, %v5781
  %v5821 = vadd.f32 %v5297, %v5786
  %v5822 = vadd.f32 %v5298, %v5789
  %v5823 = vadd.f32 %v5299, %v5794
  %v5824 = vadd.f32 %v5300, %v5797
  %v5825 = vadd.f32 %v5301, %v5802
  %v5826 = vadd.f32 %v5302, %v5805
  %v5827 = vadd.f32 %v5303, %v5810
  %s5828 = scalar_lea.vmem %s3, 2080
  %v5829 = vld [vmem:[%s5828] sm:$0xff]
  %v5830 = vld [vmem:[%s5828 + $0x8] sm:$0xff]
  %v5831 = vld [vmem:[%s5828 + $0x10] sm:$0xff]
  %v5832 = vld [vmem:[%s5828 + $0x18] sm:$0xff]
  %v5833 = vld [vmem:[%s5828 + $0x20] sm:$0xff]
  %v5834 = vld [vmem:[%s5828 + $0x28] sm:$0xff]
  %v5835 = vld [vmem:[%s5828 + $0x30] sm:$0xff]
  %v5836 = vld [vmem:[%s5828 + $0x38] sm:$0xff]
  %v5837 = vld [vmem:[%s5828 + $0x40] sm:$0xff]
  %v5838 = vld [vmem:[%s5828 + $0x48] sm:$0xff]
  %v5839 = vld [vmem:[%s5828 + $0x50] sm:$0xff]
  %v5840 = vld [vmem:[%s5828 + $0x58] sm:$0xff]
  %v5841 = vld [vmem:[%s5828 + $0x60] sm:$0xff]
  %v5842 = vld [vmem:[%s5828 + $0x68] sm:$0xff]
  %v5843 = vld [vmem:[%s5828 + $0x70] sm:$0xff]
  %v5844 = vld [vmem:[%s5828 + $0x78] sm:$0xff]
  %v5845 = vld [vmem:[%s5828 + $0x80] sm:$0xff]
  %v5846 = vld [vmem:[%s5828 + $0x88] sm:$0xff]
  %v5847 = vld [vmem:[%s5828 + $0x90] sm:$0xff]
  %v5848 = vld [vmem:[%s5828 + $0x98] sm:$0xff]
  %v5849 = vld [vmem:[%s5828 + $0xa0] sm:$0xff]
  %v5850 = vld [vmem:[%s5828 + $0xa8] sm:$0xff]
  %v5851 = vld [vmem:[%s5828 + $0xb0] sm:$0xff]
  %v5852 = vld [vmem:[%s5828 + $0xb8] sm:$0xff]
  %v5853 = vld [vmem:[%s5828 + $0xc0] sm:$0xff]
  %v5854 = vld [vmem:[%s5828 + $0xc8] sm:$0xff]
  %v5881 = vunpack.c.l.b16 %v5829
  %v5882 = vunpack.c.h.b16 %v5829
  %v5883 = vunpack.c.l.b16 %v5830
  %v5884 = vunpack.c.h.b16 %v5830
  %v5885 = vunpack.c.l.b16 %v5831
  %v5886 = vunpack.c.h.b16 %v5831
  %v5887 = vunpack.c.l.b16 %v5832
  %v5888 = vunpack.c.h.b16 %v5832
  %v5889 = vunpack.c.l.b16 %v5833
  %v5890 = vunpack.c.h.b16 %v5833
  %v5891 = vunpack.c.l.b16 %v5834
  %v5892 = vunpack.c.h.b16 %v5834
  %v5893 = vunpack.c.l.b16 %v5835
  %v5894 = vunpack.c.h.b16 %v5835
  %v5895 = vunpack.c.l.b16 %v5836
  %v5896 = vunpack.c.h.b16 %v5836
  %v5897 = vunpack.c.l.b16 %v5837
  %v5898 = vunpack.c.h.b16 %v5837
  %v5899 = vunpack.c.l.b16 %v5838
  %v5900 = vunpack.c.h.b16 %v5838
  %v5901 = vunpack.c.l.b16 %v5839
  %v5902 = vunpack.c.h.b16 %v5839
  %v5903 = vunpack.c.l.b16 %v5840
  %v5904 = vunpack.c.h.b16 %v5840
  %v5905 = vunpack.c.l.b16 %v5841
  %v5906 = vunpack.c.h.b16 %v5841
  %v5907 = vunpack.c.l.b16 %v5842
  %v5908 = vunpack.c.h.b16 %v5842
  %v5909 = vunpack.c.l.b16 %v5843
  %v5910 = vunpack.c.h.b16 %v5843
  %v5911 = vunpack.c.l.b16 %v5844
  %v5912 = vunpack.c.h.b16 %v5844
  %v5913 = vunpack.c.l.b16 %v5845
  %v5914 = vunpack.c.h.b16 %v5845
  %v5915 = vunpack.c.l.b16 %v5846
  %v5916 = vunpack.c.h.b16 %v5846
  %v5917 = vunpack.c.l.b16 %v5847
  %v5918 = vunpack.c.h.b16 %v5847
  %v5919 = vunpack.c.l.b16 %v5848
  %v5920 = vunpack.c.h.b16 %v5848
  %v5921 = vunpack.c.l.b16 %v5849
  %v5922 = vunpack.c.h.b16 %v5849
  %v5923 = vunpack.c.l.b16 %v5850
  %v5924 = vunpack.c.h.b16 %v5850
  %v5925 = vunpack.c.l.b16 %v5851
  %v5926 = vunpack.c.h.b16 %v5851
  %v5927 = vunpack.c.l.b16 %v5852
  %v5928 = vunpack.c.h.b16 %v5852
  %v5929 = vunpack.c.l.b16 %v5853
  %v5930 = vunpack.c.h.b16 %v5853
  %v5931 = vunpack.c.l.b16 %v5854
  %v5932 = vunpack.c.h.b16 %v5854
  %v5933 = vpack.c.b16 %v5885, %v5881
  %v5934 = vpack.c.b16 %v5886, %v5882
  %v5935 = vpack.c.b16 %v5887, %v5883
  %v5936 = vpack.c.b16 %v5888, %v5884
  %v5937 = vpack.c.b16 %v5893, %v5889
  %v5938 = vpack.c.b16 %v5894, %v5890
  %v5939 = vpack.c.b16 %v5895, %v5891
  %v5940 = vpack.c.b16 %v5896, %v5892
  %v5941 = vpack.c.b16 %v5901, %v5897
  %v5942 = vpack.c.b16 %v5902, %v5898
  %v5943 = vpack.c.b16 %v5903, %v5899
  %v5944 = vpack.c.b16 %v5904, %v5900
  %v5945 = vpack.c.b16 %v5909, %v5905
  %v5946 = vpack.c.b16 %v5910, %v5906
  %v5947 = vpack.c.b16 %v5911, %v5907
  %v5948 = vpack.c.b16 %v5912, %v5908
  %v5949 = vpack.c.b16 %v5917, %v5913
  %v5950 = vpack.c.b16 %v5918, %v5914
  %v5951 = vpack.c.b16 %v5919, %v5915
  %v5952 = vpack.c.b16 %v5920, %v5916
  %v5953 = vpack.c.b16 %v5925, %v5921
  %v5954 = vpack.c.b16 %v5926, %v5922
  %v5955 = vpack.c.b16 %v5927, %v5923
  %v5956 = vpack.c.b16 %v5928, %v5924
  %v5957 = vpack.c.b16 %v5929, %v5929
  %v5958 = vpack.c.b16 %v5930, %v5930
  %v5959 = vpack.c.b16 %v5931, %v5931
  %v5960 = vpack.c.b16 %v5932, %v5932
  %v5983 = vsel %vm764, %v5936, 0
  %v5986 = vsel %vm764, %v5940, 0
  %v5989 = vsel %vm764, %v5944, 0
  %v5992 = vsel %vm764, %v5948, 0
  %v5995 = vsel %vm764, %v5952, 0
  %v5998 = vsel %vm764, %v5956, 0
  %v6001 = vsel %vm764, %v5960, 0
  %6003 = vmatprep.subr.bf16.mxu0 0
  %6004 = vmatpush1.bf16.msra.mxu0 %v586
  %6005 = vmatprep.subr.bf16.mxu0 0
  %6006 = vmatpush1.bf16.msra.mxu0 %v587
  %6007 = vmatprep.subr.bf16.mxu0 0
  %6008 = vmatpush1.bf16.msra.mxu0 %v588
  %6009 = vmatprep.subr.bf16.mxu0 0
  %6010 = vmatpush1.bf16.msra.mxu0 %v589
  %6011 = vmatprep.subr.bf16.mxu0 0
  %6012 = vmatpush1.bf16.msra.mxu0 %v590
  %6013 = vmatprep.subr.bf16.mxu0 0
  %6014 = vmatpush1.bf16.msra.mxu0 %v591
  %6015 = vmatprep.subr.bf16.mxu0 0
  %6016 = vmatpush1.bf16.msra.mxu0 %v592
  %6017 = vmatprep.subr.bf16.mxu0 0
  %6018 = vmatpush1.bf16.msra.mxu0 %v593
  %6019 = vmatprep.subr.bf16.mxu0 0
  %6020 = vmatpush1.bf16.msra.mxu0 %v594
  %6021 = vmatprep.subr.bf16.mxu0 0
  %6022 = vmatpush1.bf16.msra.mxu0 %v595
  %6023 = vmatprep.subr.bf16.mxu0 0
  %6024 = vmatpush1.bf16.msra.mxu0 %v596
  %6025 = vmatprep.subr.bf16.mxu0 0
  %6026 = vmatpush1.bf16.msra.mxu0 %v597
  %6027 = vmatprep.subr.bf16.mxu0 0
  %6028 = vmatpush1.bf16.msra.mxu0 %v598
  %6029 = vmatprep.subr.bf16.mxu0 0
  %6030 = vmatpush1.bf16.msra.mxu0 %v599
  %6031 = vmatprep.subr.bf16.mxu0 0
  %6032 = vmatpush1.bf16.msra.mxu0 %v600
  %6033 = vmatprep.subr.bf16.mxu0 0
  %6034 = vmatpush1.bf16.msra.mxu0 %v601
  %6035 = vmatprep.mubr.bf16.mxu0 %v5934
  %6036 = vmatmul.mubr.bf16.gmra.mrb[0].mxu0 %v5933
  %v6037 = vpop.f32.mrb[0].mxu0
  %v6038 = vadd.f32 0.0, %v6037
  %v6039 = vpop.f32.mrb[0].mxu0
  %v6040 = vpop.f32.mrb[0].mxu0
  %v6041 = vadd.f32 0.0, %v6040
  %v6042 = vpop.f32.mrb[0].mxu0
  %6043 = vmatprep.mubr.bf16.mxu0 %v5938
  %6044 = vmatmul.mubr.bf16.gmra.mrb[0].mxu0 %v5937
  %v6045 = vpop.f32.mrb[0].mxu0
  %v6046 = vadd.f32 0.0, %v6045
  %v6047 = vpop.f32.mrb[0].mxu0
  %v6048 = vpop.f32.mrb[0].mxu0
  %v6049 = vadd.f32 0.0, %v6048
  %v6050 = vpop.f32.mrb[0].mxu0
  %6051 = vmatprep.mubr.bf16.mxu0 %v5942
  %6052 = vmatmul.mubr.bf16.gmra.mrb[0].mxu0 %v5941
  %v6053 = vpop.f32.mrb[0].mxu0
  %v6054 = vadd.f32 0.0, %v6053
  %v6055 = vpop.f32.mrb[0].mxu0
  %v6056 = vpop.f32.mrb[0].mxu0
  %v6057 = vadd.f32 0.0, %v6056
  %v6058 = vpop.f32.mrb[0].mxu0
  %6059 = vmatprep.mubr.bf16.mxu0 %v5946
  %6060 = vmatmul.mubr.bf16.gmra.mrb[0].mxu0 %v5945
  %v6061 = vpop.f32.mrb[0].mxu0
  %v6062 = vadd.f32 0.0, %v6061
  %v6063 = vpop.f32.mrb[0].mxu0
  %v6064 = vpop.f32.mrb[0].mxu0
  %v6065 = vadd.f32 0.0, %v6064
  %v6066 = vpop.f32.mrb[0].mxu0
  %6067 = vmatprep.mubr.bf16.mxu0 %v5950
  %6068 = vmatmul.mubr.bf16.gmra.mrb[0].mxu0 %v5949
  %v6069 = vpop.f32.mrb[0].mxu0
  %v6070 = vadd.f32 0.0, %v6069
  %v6071 = vpop.f32.mrb[0].mxu0
  %v6072 = vpop.f32.mrb[0].mxu0
  %v6073 = vadd.f32 0.0, %v6072
  %v6074 = vpop.f32.mrb[0].mxu0
  %6075 = vmatprep.mubr.bf16.mxu0 %v5954
  %6076 = vmatmul.mubr.bf16.gmra.mrb[0].mxu0 %v5953
  %v6077 = vpop.f32.mrb[0].mxu0
  %v6078 = vadd.f32 0.0, %v6077
  %v6079 = vpop.f32.mrb[0].mxu0
  %v6080 = vpop.f32.mrb[0].mxu0
  %v6081 = vadd.f32 0.0, %v6080
  %v6082 = vpop.f32.mrb[0].mxu0
  %6083 = vmatprep.mubr.bf16.mxu0 %v5958
  %6084 = vmatmul.mubr.bf16.gmra.mrb[0].mxu0 %v5957
  %v6085 = vpop.f32.mrb[0].mxu0
  %v6086 = vadd.f32 0.0, %v6085
  %v6087 = vpop.f32.mrb[0].mxu0
  %v6088 = vpop.f32.mrb[0].mxu0
  %v6089 = vpop.f32.mrb[0].mxu0
  %6090 = vdwg.mxu0
  %6091 = vmatprep.subr.bf16.mxu0 0
  %6092 = vmatpush1.bf16.msra.mxu0 %v602
  %6093 = vmatprep.subr.bf16.mxu0 0
  %6094 = vmatpush1.bf16.msra.mxu0 %v603
  %6095 = vmatprep.subr.bf16.mxu0 0
  %6096 = vmatpush1.bf16.msra.mxu0 %v604
  %6097 = vmatprep.subr.bf16.mxu0 0
  %6098 = vmatpush1.bf16.msra.mxu0 %v605
  %6099 = vmatprep.subr.bf16.mxu0 0
  %6100 = vmatpush1.bf16.msra.mxu0 %v606
  %6101 = vmatprep.subr.bf16.mxu0 0
  %6102 = vmatpush1.bf16.msra.mxu0 %v607
  %6103 = vmatprep.subr.bf16.mxu0 0
  %6104 = vmatpush1.bf16.msra.mxu0 %v608
  %6105 = vmatprep.subr.bf16.mxu0 0
  %6106 = vmatpush1.bf16.msra.mxu0 %v609
  %6107 = vmatprep.subr.bf16.mxu0 0
  %6108 = vmatpush1.bf16.msra.mxu0 %v788
  %6109 = vmatprep.subr.bf16.mxu0 0
  %6110 = vmatpush1.bf16.msra.mxu0 0
  %6111 = vmatprep.subr.bf16.mxu0 0
  %6112 = vmatpush1.bf16.msra.mxu0 0
  %6113 = vmatprep.subr.bf16.mxu0 0
  %6114 = vmatpush1.bf16.msra.mxu0 0
  %6115 = vmatprep.subr.bf16.mxu0 0
  %6116 = vmatpush1.bf16.msra.mxu0 0
  %6117 = vmatprep.subr.bf16.mxu0 0
  %6118 = vmatpush1.bf16.msra.mxu0 0
  %6119 = vmatprep.subr.bf16.mxu0 0
  %6120 = vmatpush1.bf16.msra.mxu0 0
  %6121 = vmatprep.subr.bf16.mxu0 0
  %6122 = vmatpush1.bf16.msra.mxu0 0
  %6123 = vmatprep.mubr.bf16.mxu0 %v5983
  %6124 = vmatmul.mubr.bf16.gmra.mrb[0].mxu0 %v5935
  %v6125 = vpop.f32.mrb[0].mxu0
  %v6126 = vadd.f32 %v6038, %v6125
  %v6127 = vpop.f32.mrb[0].mxu0
  %v6128 = vpop.f32.mrb[0].mxu0
  %v6129 = vadd.f32 %v6041, %v6128
  %v6130 = vpop.f32.mrb[0].mxu0
  %6131 = vmatprep.mubr.bf16.mxu0 %v5986
  %6132 = vmatmul.mubr.bf16.gmra.mrb[0].mxu0 %v5939
  %v6133 = vpop.f32.mrb[0].mxu0
  %v6134 = vadd.f32 %v6046, %v6133
  %v6135 = vpop.f32.mrb[0].mxu0
  %v6136 = vpop.f32.mrb[0].mxu0
  %v6137 = vadd.f32 %v6049, %v6136
  %v6138 = vpop.f32.mrb[0].mxu0
  %6139 = vmatprep.mubr.bf16.mxu0 %v5989
  %6140 = vmatmul.mubr.bf16.gmra.mrb[0].mxu0 %v5943
  %v6141 = vpop.f32.mrb[0].mxu0
  %v6142 = vadd.f32 %v6054, %v6141
  %v6143 = vpop.f32.mrb[0].mxu0
  %v6144 = vpop.f32.mrb[0].mxu0
  %v6145 = vadd.f32 %v6057, %v6144
  %v6146 = vpop.f32.mrb[0].mxu0
  %6147 = vmatprep.mubr.bf16.mxu0 %v5992
  %6148 = vmatmul.mubr.bf16.gmra.mrb[0].mxu0 %v5947
  %v6149 = vpop.f32.mrb[0].mxu0
  %v6150 = vadd.f32 %v6062, %v6149
  %v6151 = vpop.f32.mrb[0].mxu0
  %v6152 = vpop.f32.mrb[0].mxu0
  %v6153 = vadd.f32 %v6065, %v6152
  %v6154 = vpop.f32.mrb[0].mxu0
  %6155 = vmatprep.mubr.bf16.mxu0 %v5995
  %6156 = vmatmul.mubr.bf16.gmra.mrb[0].mxu0 %v5951
  %v6157 = vpop.f32.mrb[0].mxu0
  %v6158 = vadd.f32 %v6070, %v6157
  %v6159 = vpop.f32.mrb[0].mxu0
  %v6160 = vpop.f32.mrb[0].mxu0
  %v6161 = vadd.f32 %v6073, %v6160
  %v6162 = vpop.f32.mrb[0].mxu0
  %6163 = vmatprep.mubr.bf16.mxu0 %v5998
  %6164 = vmatmul.mubr.bf16.gmra.mrb[0].mxu0 %v5955
  %v6165 = vpop.f32.mrb[0].mxu0
  %v6166 = vadd.f32 %v6078, %v6165
  %v6167 = vpop.f32.mrb[0].mxu0
  %v6168 = vpop.f32.mrb[0].mxu0
  %v6169 = vadd.f32 %v6081, %v6168
  %v6170 = vpop.f32.mrb[0].mxu0
  %6171 = vmatprep.mubr.bf16.mxu0 %v6001
  %6172 = vmatmul.mubr.bf16.gmra.mrb[0].mxu0 %v5959
  %v6173 = vpop.f32.mrb[0].mxu0
  %v6174 = vadd.f32 %v6086, %v6173
  %v6175 = vpop.f32.mrb[0].mxu0
  %v6176 = vpop.f32.mrb[0].mxu0
  %v6177 = vpop.f32.mrb[0].mxu0
  %6178 = vdwg.mxu0
  %v6179 = vpack.c.bf16 %v6129, %v6126
  %v6180 = vpack.c.bf16 %v6137, %v6134
  %v6181 = vpack.c.bf16 %v6145, %v6142
  %v6182 = vpack.c.bf16 %v6153, %v6150
  %v6183 = vpack.c.bf16 %v6161, %v6158
  %v6184 = vpack.c.bf16 %v6169, %v6166
  %v6185 = vpack.c.bf16 %v6174, %v6174
  %s6186 = scalar_lea.vmem %s4, 640
  %v6187 = vld [vmem:[%s6186] sm:$0xf]
  %v6188 = vld [vmem:[%s6186 + $0x4] sm:$0xf]
  %v6189 = vld [vmem:[%s6186 + $0x8] sm:$0xf]
  %v6190 = vld [vmem:[%s6186 + $0xc] sm:$0xf]
  %v6191 = vld [vmem:[%s6186 + $0x10] sm:$0xf]
  %v6192 = vld [vmem:[%s6186 + $0x14] sm:$0xf]
  %v6193 = vld [vmem:[%s6186 + $0x18] sm:$0xf]
  %v6194 = vld [vmem:[%s6186 + $0x1c] sm:$0xf]
  %v6195 = vld [vmem:[%s6186 + $0x20] sm:$0xf]
  %v6196 = vld [vmem:[%s6186 + $0x24] sm:$0xf]
  %v6197 = vld [vmem:[%s6186 + $0x28] sm:$0xf]
  %v6198 = vld [vmem:[%s6186 + $0x2c] sm:$0xf]
  %v6199 = vld [vmem:[%s6186 + $0x30] sm:$0xf]
  %v6200 = vld [vmem:[%s6186 + $0x34] sm:$0xf]
  %v6201 = vld [vmem:[%s6186 + $0x38] sm:$0xf]
  %v6202 = vld [vmem:[%s6186 + $0x3c] sm:$0xf]
  %v6219 = vunpack.c.l.b16 %v6187
  %v6220 = vunpack.c.l.b16 %v6188
  %v6221 = vunpack.c.l.b16 %v6189
  %v6222 = vunpack.c.l.b16 %v6190
  %v6223 = vunpack.c.l.b16 %v6191
  %v6224 = vunpack.c.l.b16 %v6192
  %v6225 = vunpack.c.l.b16 %v6193
  %v6226 = vunpack.c.l.b16 %v6194
  %v6227 = vunpack.c.l.b16 %v6195
  %v6228 = vunpack.c.l.b16 %v6196
  %v6229 = vunpack.c.l.b16 %v6197
  %v6230 = vunpack.c.l.b16 %v6198
  %v6231 = vunpack.c.l.b16 %v6199
  %v6232 = vunpack.c.l.b16 %v6200
  %v6233 = vunpack.c.l.b16 %v6201
  %v6234 = vunpack.c.l.b16 %v6202
  %v6235 = vpack.c.b16 %v6220, %v6219
  %v6236 = vpack.c.b16 %v6222, %v6221
  %v6237 = vpack.c.b16 %v6224, %v6223
  %v6238 = vpack.c.b16 %v6226, %v6225
  %v6239 = vpack.c.b16 %v6228, %v6227
  %v6240 = vpack.c.b16 %v6230, %v6229
  %v6241 = vpack.c.b16 %v6232, %v6231
  %v6242 = vpack.c.b16 %v6234, %v6233
  %6251 = vmatprep.subr.bf16.mxu0 0
  %6252 = vmatpush1.bf16.msra.mxu0 %v6235
  %6253 = vmatprep.subr.bf16.mxu0 0
  %6254 = vmatpush1.bf16.msra.mxu0 %v6236
  %6255 = vmatprep.subr.bf16.mxu0 0
  %6256 = vmatpush1.bf16.msra.mxu0 %v6237
  %6257 = vmatprep.subr.bf16.mxu0 0
  %6258 = vmatpush1.bf16.msra.mxu0 %v6238
  %6259 = vmatprep.subr.bf16.mxu0 0
  %6260 = vmatpush1.bf16.msra.mxu0 %v6239
  %6261 = vmatprep.subr.bf16.mxu0 0
  %6262 = vmatpush1.bf16.msra.mxu0 %v6240
  %6263 = vmatprep.subr.bf16.mxu0 0
  %6264 = vmatpush1.bf16.msra.mxu0 %v6241
  %6265 = vmatprep.subr.bf16.mxu0 0
  %6266 = vmatpush1.bf16.msra.mxu0 %v6242
  %6267 = vmatprep.subr.bf16.mxu0 0
  %6268 = vmatpush1.bf16.msra.mxu0 0
  %6269 = vmatprep.subr.bf16.mxu0 0
  %6270 = vmatpush1.bf16.msra.mxu0 0
  %6271 = vmatprep.subr.bf16.mxu0 0
  %6272 = vmatpush1.bf16.msra.mxu0 0
  %6273 = vmatprep.subr.bf16.mxu0 0
  %6274 = vmatpush1.bf16.msra.mxu0 0
  %6275 = vmatprep.subr.bf16.mxu0 0
  %6276 = vmatpush1.bf16.msra.mxu0 0
  %6277 = vmatprep.subr.bf16.mxu0 0
  %6278 = vmatpush1.bf16.msra.mxu0 0
  %6279 = vmatprep.subr.bf16.mxu0 0
  %6280 = vmatpush1.bf16.msra.mxu0 0
  %6281 = vmatprep.subr.bf16.mxu0 0
  %6282 = vmatpush1.bf16.msra.mxu0 0
  %6283 = vmatprep.mubr.bf16.mxu0 0
  %6284 = vmatmul.mubr.bf16.gmra.mrb[0].mxu0 %v6179
  %v6285 = vpop.f32.mrb[0].mxu0
  %v6286 = vadd.f32 0.0, %v6285
  %v6287 = vpop.f32.mrb[0].mxu0
  %v6288 = vpop.f32.mrb[0].mxu0
  %v6289 = vadd.f32 0.0, %v6288
  %v6290 = vpop.f32.mrb[0].mxu0
  %6291 = vmatprep.mubr.bf16.mxu0 0
  %6292 = vmatmul.mubr.bf16.gmra.mrb[0].mxu0 %v6180
  %v6293 = vpop.f32.mrb[0].mxu0
  %v6294 = vadd.f32 0.0, %v6293
  %v6295 = vpop.f32.mrb[0].mxu0
  %v6296 = vpop.f32.mrb[0].mxu0
  %v6297 = vadd.f32 0.0, %v6296
  %v6298 = vpop.f32.mrb[0].mxu0
  %6299 = vmatprep.mubr.bf16.mxu0 0
  %6300 = vmatmul.mubr.bf16.gmra.mrb[0].mxu0 %v6181
  %v6301 = vpop.f32.mrb[0].mxu0
  %v6302 = vadd.f32 0.0, %v6301
  %v6303 = vpop.f32.mrb[0].mxu0
  %v6304 = vpop.f32.mrb[0].mxu0
  %v6305 = vadd.f32 0.0, %v6304
  %v6306 = vpop.f32.mrb[0].mxu0
  %6307 = vmatprep.mubr.bf16.mxu0 0
  %6308 = vmatmul.mubr.bf16.gmra.mrb[0].mxu0 %v6182
  %v6309 = vpop.f32.mrb[0].mxu0
  %v6310 = vadd.f32 0.0, %v6309
  %v6311 = vpop.f32.mrb[0].mxu0
  %v6312 = vpop.f32.mrb[0].mxu0
  %v6313 = vadd.f32 0.0, %v6312
  %v6314 = vpop.f32.mrb[0].mxu0
  %6315 = vmatprep.mubr.bf16.mxu0 0
  %6316 = vmatmul.mubr.bf16.gmra.mrb[0].mxu0 %v6183
  %v6317 = vpop.f32.mrb[0].mxu0
  %v6318 = vadd.f32 0.0, %v6317
  %v6319 = vpop.f32.mrb[0].mxu0
  %v6320 = vpop.f32.mrb[0].mxu0
  %v6321 = vadd.f32 0.0, %v6320
  %v6322 = vpop.f32.mrb[0].mxu0
  %6323 = vmatprep.mubr.bf16.mxu0 0
  %6324 = vmatmul.mubr.bf16.gmra.mrb[0].mxu0 %v6184
  %v6325 = vpop.f32.mrb[0].mxu0
  %v6326 = vadd.f32 0.0, %v6325
  %v6327 = vpop.f32.mrb[0].mxu0
  %v6328 = vpop.f32.mrb[0].mxu0
  %v6329 = vadd.f32 0.0, %v6328
  %v6330 = vpop.f32.mrb[0].mxu0
  %6331 = vmatprep.mubr.bf16.mxu0 0
  %6332 = vmatmul.mubr.bf16.gmra.mrb[0].mxu0 %v6185
  %v6333 = vpop.f32.mrb[0].mxu0
  %v6334 = vadd.f32 0.0, %v6333
  %v6335 = vpop.f32.mrb[0].mxu0
  %v6336 = vpop.f32.mrb[0].mxu0
  %v6337 = vpop.f32.mrb[0].mxu0
  %6338 = vdwg.mxu0
  %v6339 = vadd.f32 %v5815, %v6286
  %v6340 = vadd.f32 %v5816, %v6289
  %v6341 = vadd.f32 %v5817, %v6294
  %v6342 = vadd.f32 %v5818, %v6297
  %v6343 = vadd.f32 %v5819, %v6302
  %v6344 = vadd.f32 %v5820, %v6305
  %v6345 = vadd.f32 %v5821, %v6310
  %v6346 = vadd.f32 %v5822, %v6313
  %v6347 = vadd.f32 %v5823, %v6318
  %v6348 = vadd.f32 %v5824, %v6321
  %v6349 = vadd.f32 %v5825, %v6326
  %v6350 = vadd.f32 %v5826, %v6329
  %v6351 = vadd.f32 %v5827, %v6334
  %s6352 = scalar_lea.vmem %s3, 2288
  %v6353 = vld [vmem:[%s6352] sm:$0xff]
  %v6354 = vld [vmem:[%s6352 + $0x8] sm:$0xff]
  %v6355 = vld [vmem:[%s6352 + $0x10] sm:$0xff]
  %v6356 = vld [vmem:[%s6352 + $0x18] sm:$0xff]
  %v6357 = vld [vmem:[%s6352 + $0x20] sm:$0xff]
  %v6358 = vld [vmem:[%s6352 + $0x28] sm:$0xff]
  %v6359 = vld [vmem:[%s6352 + $0x30] sm:$0xff]
  %v6360 = vld [vmem:[%s6352 + $0x38] sm:$0xff]
  %v6361 = vld [vmem:[%s6352 + $0x40] sm:$0xff]
  %v6362 = vld [vmem:[%s6352 + $0x48] sm:$0xff]
  %v6363 = vld [vmem:[%s6352 + $0x50] sm:$0xff]
  %v6364 = vld [vmem:[%s6352 + $0x58] sm:$0xff]
  %v6365 = vld [vmem:[%s6352 + $0x60] sm:$0xff]
  %v6366 = vld [vmem:[%s6352 + $0x68] sm:$0xff]
  %v6367 = vld [vmem:[%s6352 + $0x70] sm:$0xff]
  %v6368 = vld [vmem:[%s6352 + $0x78] sm:$0xff]
  %v6369 = vld [vmem:[%s6352 + $0x80] sm:$0xff]
  %v6370 = vld [vmem:[%s6352 + $0x88] sm:$0xff]
  %v6371 = vld [vmem:[%s6352 + $0x90] sm:$0xff]
  %v6372 = vld [vmem:[%s6352 + $0x98] sm:$0xff]
  %v6373 = vld [vmem:[%s6352 + $0xa0] sm:$0xff]
  %v6374 = vld [vmem:[%s6352 + $0xa8] sm:$0xff]
  %v6375 = vld [vmem:[%s6352 + $0xb0] sm:$0xff]
  %v6376 = vld [vmem:[%s6352 + $0xb8] sm:$0xff]
  %v6377 = vld [vmem:[%s6352 + $0xc0] sm:$0xff]
  %v6378 = vld [vmem:[%s6352 + $0xc8] sm:$0xff]
  %v6405 = vunpack.c.l.b16 %v6353
  %v6406 = vunpack.c.h.b16 %v6353
  %v6407 = vunpack.c.l.b16 %v6354
  %v6408 = vunpack.c.h.b16 %v6354
  %v6409 = vunpack.c.l.b16 %v6355
  %v6410 = vunpack.c.h.b16 %v6355
  %v6411 = vunpack.c.l.b16 %v6356
  %v6412 = vunpack.c.h.b16 %v6356
  %v6413 = vunpack.c.l.b16 %v6357
  %v6414 = vunpack.c.h.b16 %v6357
  %v6415 = vunpack.c.l.b16 %v6358
  %v6416 = vunpack.c.h.b16 %v6358
  %v6417 = vunpack.c.l.b16 %v6359
  %v6418 = vunpack.c.h.b16 %v6359
  %v6419 = vunpack.c.l.b16 %v6360
  %v6420 = vunpack.c.h.b16 %v6360
  %v6421 = vunpack.c.l.b16 %v6361
  %v6422 = vunpack.c.h.b16 %v6361
  %v6423 = vunpack.c.l.b16 %v6362
  %v6424 = vunpack.c.h.b16 %v6362
  %v6425 = vunpack.c.l.b16 %v6363
  %v6426 = vunpack.c.h.b16 %v6363
  %v6427 = vunpack.c.l.b16 %v6364
  %v6428 = vunpack.c.h.b16 %v6364
  %v6429 = vunpack.c.l.b16 %v6365
  %v6430 = vunpack.c.h.b16 %v6365
  %v6431 = vunpack.c.l.b16 %v6366
  %v6432 = vunpack.c.h.b16 %v6366
  %v6433 = vunpack.c.l.b16 %v6367
  %v6434 = vunpack.c.h.b16 %v6367
  %v6435 = vunpack.c.l.b16 %v6368
  %v6436 = vunpack.c.h.b16 %v6368
  %v6437 = vunpack.c.l.b16 %v6369
  %v6438 = vunpack.c.h.b16 %v6369
  %v6439 = vunpack.c.l.b16 %v6370
  %v6440 = vunpack.c.h.b16 %v6370
  %v6441 = vunpack.c.l.b16 %v6371
  %v6442 = vunpack.c.h.b16 %v6371
  %v6443 = vunpack.c.l.b16 %v6372
  %v6444 = vunpack.c.h.b16 %v6372
  %v6445 = vunpack.c.l.b16 %v6373
  %v6446 = vunpack.c.h.b16 %v6373
  %v6447 = vunpack.c.l.b16 %v6374
  %v6448 = vunpack.c.h.b16 %v6374
  %v6449 = vunpack.c.l.b16 %v6375
  %v6450 = vunpack.c.h.b16 %v6375
  %v6451 = vunpack.c.l.b16 %v6376
  %v6452 = vunpack.c.h.b16 %v6376
  %v6453 = vunpack.c.l.b16 %v6377
  %v6454 = vunpack.c.h.b16 %v6377
  %v6455 = vunpack.c.l.b16 %v6378
  %v6456 = vunpack.c.h.b16 %v6378
  %v6457 = vpack.c.b16 %v6409, %v6405
  %v6458 = vpack.c.b16 %v6410, %v6406
  %v6459 = vpack.c.b16 %v6411, %v6407
  %v6460 = vpack.c.b16 %v6412, %v6408
  %v6461 = vpack.c.b16 %v6417, %v6413
  %v6462 = vpack.c.b16 %v6418, %v6414
  %v6463 = vpack.c.b16 %v6419, %v6415
  %v6464 = vpack.c.b16 %v6420, %v6416
  %v6465 = vpack.c.b16 %v6425, %v6421
  %v6466 = vpack.c.b16 %v6426, %v6422
  %v6467 = vpack.c.b16 %v6427, %v6423
  %v6468 = vpack.c.b16 %v6428, %v6424
  %v6469 = vpack.c.b16 %v6433, %v6429
  %v6470 = vpack.c.b16 %v6434, %v6430
  %v6471 = vpack.c.b16 %v6435, %v6431
  %v6472 = vpack.c.b16 %v6436, %v6432
  %v6473 = vpack.c.b16 %v6441, %v6437
  %v6474 = vpack.c.b16 %v6442, %v6438
  %v6475 = vpack.c.b16 %v6443, %v6439
  %v6476 = vpack.c.b16 %v6444, %v6440
  %v6477 = vpack.c.b16 %v6449, %v6445
  %v6478 = vpack.c.b16 %v6450, %v6446
  %v6479 = vpack.c.b16 %v6451, %v6447
  %v6480 = vpack.c.b16 %v6452, %v6448
  %v6481 = vpack.c.b16 %v6453, %v6453
  %v6482 = vpack.c.b16 %v6454, %v6454
  %v6483 = vpack.c.b16 %v6455, %v6455
  %v6484 = vpack.c.b16 %v6456, %v6456
  %v6507 = vsel %vm764, %v6460, 0
  %v6510 = vsel %vm764, %v6464, 0
  %v6513 = vsel %vm764, %v6468, 0
  %v6516 = vsel %vm764, %v6472, 0
  %v6519 = vsel %vm764, %v6476, 0
  %v6522 = vsel %vm764, %v6480, 0
  %v6525 = vsel %vm764, %v6484, 0
  %6527 = vmatprep.subr.bf16.mxu0 0
  %6528 = vmatpush1.bf16.msra.mxu0 %v586
  %6529 = vmatprep.subr.bf16.mxu0 0
  %6530 = vmatpush1.bf16.msra.mxu0 %v587
  %6531 = vmatprep.subr.bf16.mxu0 0
  %6532 = vmatpush1.bf16.msra.mxu0 %v588
  %6533 = vmatprep.subr.bf16.mxu0 0
  %6534 = vmatpush1.bf16.msra.mxu0 %v589
  %6535 = vmatprep.subr.bf16.mxu0 0
  %6536 = vmatpush1.bf16.msra.mxu0 %v590
  %6537 = vmatprep.subr.bf16.mxu0 0
  %6538 = vmatpush1.bf16.msra.mxu0 %v591
  %6539 = vmatprep.subr.bf16.mxu0 0
  %6540 = vmatpush1.bf16.msra.mxu0 %v592
  %6541 = vmatprep.subr.bf16.mxu0 0
  %6542 = vmatpush1.bf16.msra.mxu0 %v593
  %6543 = vmatprep.subr.bf16.mxu0 0
  %6544 = vmatpush1.bf16.msra.mxu0 %v594
  %6545 = vmatprep.subr.bf16.mxu0 0
  %6546 = vmatpush1.bf16.msra.mxu0 %v595
  %6547 = vmatprep.subr.bf16.mxu0 0
  %6548 = vmatpush1.bf16.msra.mxu0 %v596
  %6549 = vmatprep.subr.bf16.mxu0 0
  %6550 = vmatpush1.bf16.msra.mxu0 %v597
  %6551 = vmatprep.subr.bf16.mxu0 0
  %6552 = vmatpush1.bf16.msra.mxu0 %v598
  %6553 = vmatprep.subr.bf16.mxu0 0
  %6554 = vmatpush1.bf16.msra.mxu0 %v599
  %6555 = vmatprep.subr.bf16.mxu0 0
  %6556 = vmatpush1.bf16.msra.mxu0 %v600
  %6557 = vmatprep.subr.bf16.mxu0 0
  %6558 = vmatpush1.bf16.msra.mxu0 %v601
  %6559 = vmatprep.mubr.bf16.mxu0 %v6458
  %6560 = vmatmul.mubr.bf16.gmra.mrb[0].mxu0 %v6457
  %v6561 = vpop.f32.mrb[0].mxu0
  %v6562 = vadd.f32 0.0, %v6561
  %v6563 = vpop.f32.mrb[0].mxu0
  %v6564 = vpop.f32.mrb[0].mxu0
  %v6565 = vadd.f32 0.0, %v6564
  %v6566 = vpop.f32.mrb[0].mxu0
  %6567 = vmatprep.mubr.bf16.mxu0 %v6462
  %6568 = vmatmul.mubr.bf16.gmra.mrb[0].mxu0 %v6461
  %v6569 = vpop.f32.mrb[0].mxu0
  %v6570 = vadd.f32 0.0, %v6569
  %v6571 = vpop.f32.mrb[0].mxu0
  %v6572 = vpop.f32.mrb[0].mxu0
  %v6573 = vadd.f32 0.0, %v6572
  %v6574 = vpop.f32.mrb[0].mxu0
  %6575 = vmatprep.mubr.bf16.mxu0 %v6466
  %6576 = vmatmul.mubr.bf16.gmra.mrb[0].mxu0 %v6465
  %v6577 = vpop.f32.mrb[0].mxu0
  %v6578 = vadd.f32 0.0, %v6577
  %v6579 = vpop.f32.mrb[0].mxu0
  %v6580 = vpop.f32.mrb[0].mxu0
  %v6581 = vadd.f32 0.0, %v6580
  %v6582 = vpop.f32.mrb[0].mxu0
  %6583 = vmatprep.mubr.bf16.mxu0 %v6470
  %6584 = vmatmul.mubr.bf16.gmra.mrb[0].mxu0 %v6469
  %v6585 = vpop.f32.mrb[0].mxu0
  %v6586 = vadd.f32 0.0, %v6585
  %v6587 = vpop.f32.mrb[0].mxu0
  %v6588 = vpop.f32.mrb[0].mxu0
  %v6589 = vadd.f32 0.0, %v6588
  %v6590 = vpop.f32.mrb[0].mxu0
  %6591 = vmatprep.mubr.bf16.mxu0 %v6474
  %6592 = vmatmul.mubr.bf16.gmra.mrb[0].mxu0 %v6473
  %v6593 = vpop.f32.mrb[0].mxu0
  %v6594 = vadd.f32 0.0, %v6593
  %v6595 = vpop.f32.mrb[0].mxu0
  %v6596 = vpop.f32.mrb[0].mxu0
  %v6597 = vadd.f32 0.0, %v6596
  %v6598 = vpop.f32.mrb[0].mxu0
  %6599 = vmatprep.mubr.bf16.mxu0 %v6478
  %6600 = vmatmul.mubr.bf16.gmra.mrb[0].mxu0 %v6477
  %v6601 = vpop.f32.mrb[0].mxu0
  %v6602 = vadd.f32 0.0, %v6601
  %v6603 = vpop.f32.mrb[0].mxu0
  %v6604 = vpop.f32.mrb[0].mxu0
  %v6605 = vadd.f32 0.0, %v6604
  %v6606 = vpop.f32.mrb[0].mxu0
  %6607 = vmatprep.mubr.bf16.mxu0 %v6482
  %6608 = vmatmul.mubr.bf16.gmra.mrb[0].mxu0 %v6481
  %v6609 = vpop.f32.mrb[0].mxu0
  %v6610 = vadd.f32 0.0, %v6609
  %v6611 = vpop.f32.mrb[0].mxu0
  %v6612 = vpop.f32.mrb[0].mxu0
  %v6613 = vpop.f32.mrb[0].mxu0
  %6614 = vdwg.mxu0
  %6615 = vmatprep.subr.bf16.mxu0 0
  %6616 = vmatpush1.bf16.msra.mxu0 %v602
  %6617 = vmatprep.subr.bf16.mxu0 0
  %6618 = vmatpush1.bf16.msra.mxu0 %v603
  %6619 = vmatprep.subr.bf16.mxu0 0
  %6620 = vmatpush1.bf16.msra.mxu0 %v604
  %6621 = vmatprep.subr.bf16.mxu0 0
  %6622 = vmatpush1.bf16.msra.mxu0 %v605
  %6623 = vmatprep.subr.bf16.mxu0 0
  %6624 = vmatpush1.bf16.msra.mxu0 %v606
  %6625 = vmatprep.subr.bf16.mxu0 0
  %6626 = vmatpush1.bf16.msra.mxu0 %v607
  %6627 = vmatprep.subr.bf16.mxu0 0
  %6628 = vmatpush1.bf16.msra.mxu0 %v608
  %6629 = vmatprep.subr.bf16.mxu0 0
  %6630 = vmatpush1.bf16.msra.mxu0 %v609
  %6631 = vmatprep.subr.bf16.mxu0 0
  %6632 = vmatpush1.bf16.msra.mxu0 %v788
  %6633 = vmatprep.subr.bf16.mxu0 0
  %6634 = vmatpush1.bf16.msra.mxu0 0
  %6635 = vmatprep.subr.bf16.mxu0 0
  %6636 = vmatpush1.bf16.msra.mxu0 0
  %6637 = vmatprep.subr.bf16.mxu0 0
  %6638 = vmatpush1.bf16.msra.mxu0 0
  %6639 = vmatprep.subr.bf16.mxu0 0
  %6640 = vmatpush1.bf16.msra.mxu0 0
  %6641 = vmatprep.subr.bf16.mxu0 0
  %6642 = vmatpush1.bf16.msra.mxu0 0
  %6643 = vmatprep.subr.bf16.mxu0 0
  %6644 = vmatpush1.bf16.msra.mxu0 0
  %6645 = vmatprep.subr.bf16.mxu0 0
  %6646 = vmatpush1.bf16.msra.mxu0 0
  %6647 = vmatprep.mubr.bf16.mxu0 %v6507
  %6648 = vmatmul.mubr.bf16.gmra.mrb[0].mxu0 %v6459
  %v6649 = vpop.f32.mrb[0].mxu0
  %v6650 = vadd.f32 %v6562, %v6649
  %v6651 = vpop.f32.mrb[0].mxu0
  %v6652 = vpop.f32.mrb[0].mxu0
  %v6653 = vadd.f32 %v6565, %v6652
  %v6654 = vpop.f32.mrb[0].mxu0
  %6655 = vmatprep.mubr.bf16.mxu0 %v6510
  %6656 = vmatmul.mubr.bf16.gmra.mrb[0].mxu0 %v6463
  %v6657 = vpop.f32.mrb[0].mxu0
  %v6658 = vadd.f32 %v6570, %v6657
  %v6659 = vpop.f32.mrb[0].mxu0
  %v6660 = vpop.f32.mrb[0].mxu0
  %v6661 = vadd.f32 %v6573, %v6660
  %v6662 = vpop.f32.mrb[0].mxu0
  %6663 = vmatprep.mubr.bf16.mxu0 %v6513
  %6664 = vmatmul.mubr.bf16.gmra.mrb[0].mxu0 %v6467
  %v6665 = vpop.f32.mrb[0].mxu0
  %v6666 = vadd.f32 %v6578, %v6665
  %v6667 = vpop.f32.mrb[0].mxu0
  %v6668 = vpop.f32.mrb[0].mxu0
  %v6669 = vadd.f32 %v6581, %v6668
  %v6670 = vpop.f32.mrb[0].mxu0
  %6671 = vmatprep.mubr.bf16.mxu0 %v6516
  %6672 = vmatmul.mubr.bf16.gmra.mrb[0].mxu0 %v6471
  %v6673 = vpop.f32.mrb[0].mxu0
  %v6674 = vadd.f32 %v6586, %v6673
  %v6675 = vpop.f32.mrb[0].mxu0
  %v6676 = vpop.f32.mrb[0].mxu0
  %v6677 = vadd.f32 %v6589, %v6676
  %v6678 = vpop.f32.mrb[0].mxu0
  %6679 = vmatprep.mubr.bf16.mxu0 %v6519
  %6680 = vmatmul.mubr.bf16.gmra.mrb[0].mxu0 %v6475
  %v6681 = vpop.f32.mrb[0].mxu0
  %v6682 = vadd.f32 %v6594, %v6681
  %v6683 = vpop.f32.mrb[0].mxu0
  %v6684 = vpop.f32.mrb[0].mxu0
  %v6685 = vadd.f32 %v6597, %v6684
  %v6686 = vpop.f32.mrb[0].mxu0
  %6687 = vmatprep.mubr.bf16.mxu0 %v6522
  %6688 = vmatmul.mubr.bf16.gmra.mrb[0].mxu0 %v6479
  %v6689 = vpop.f32.mrb[0].mxu0
  %v6690 = vadd.f32 %v6602, %v6689
  %v6691 = vpop.f32.mrb[0].mxu0
  %v6692 = vpop.f32.mrb[0].mxu0
  %v6693 = vadd.f32 %v6605, %v6692
  %v6694 = vpop.f32.mrb[0].mxu0
  %6695 = vmatprep.mubr.bf16.mxu0 %v6525
  %6696 = vmatmul.mubr.bf16.gmra.mrb[0].mxu0 %v6483
  %v6697 = vpop.f32.mrb[0].mxu0
  %v6698 = vadd.f32 %v6610, %v6697
  %v6699 = vpop.f32.mrb[0].mxu0
  %v6700 = vpop.f32.mrb[0].mxu0
  %v6701 = vpop.f32.mrb[0].mxu0
  %6702 = vdwg.mxu0
  %v6703 = vpack.c.bf16 %v6653, %v6650
  %v6704 = vpack.c.bf16 %v6661, %v6658
  %v6705 = vpack.c.bf16 %v6669, %v6666
  %v6706 = vpack.c.bf16 %v6677, %v6674
  %v6707 = vpack.c.bf16 %v6685, %v6682
  %v6708 = vpack.c.bf16 %v6693, %v6690
  %v6709 = vpack.c.bf16 %v6698, %v6698
  %s6710 = scalar_lea.vmem %s4, 704
  %v6711 = vld [vmem:[%s6710] sm:$0xf]
  %v6712 = vld [vmem:[%s6710 + $0x4] sm:$0xf]
  %v6713 = vld [vmem:[%s6710 + $0x8] sm:$0xf]
  %v6714 = vld [vmem:[%s6710 + $0xc] sm:$0xf]
  %v6715 = vld [vmem:[%s6710 + $0x10] sm:$0xf]
  %v6716 = vld [vmem:[%s6710 + $0x14] sm:$0xf]
  %v6717 = vld [vmem:[%s6710 + $0x18] sm:$0xf]
  %v6718 = vld [vmem:[%s6710 + $0x1c] sm:$0xf]
  %v6719 = vld [vmem:[%s6710 + $0x20] sm:$0xf]
  %v6720 = vld [vmem:[%s6710 + $0x24] sm:$0xf]
  %v6721 = vld [vmem:[%s6710 + $0x28] sm:$0xf]
  %v6722 = vld [vmem:[%s6710 + $0x2c] sm:$0xf]
  %v6723 = vld [vmem:[%s6710 + $0x30] sm:$0xf]
  %v6724 = vld [vmem:[%s6710 + $0x34] sm:$0xf]
  %v6725 = vld [vmem:[%s6710 + $0x38] sm:$0xf]
  %v6726 = vld [vmem:[%s6710 + $0x3c] sm:$0xf]
  %v6743 = vunpack.c.l.b16 %v6711
  %v6744 = vunpack.c.l.b16 %v6712
  %v6745 = vunpack.c.l.b16 %v6713
  %v6746 = vunpack.c.l.b16 %v6714
  %v6747 = vunpack.c.l.b16 %v6715
  %v6748 = vunpack.c.l.b16 %v6716
  %v6749 = vunpack.c.l.b16 %v6717
  %v6750 = vunpack.c.l.b16 %v6718
  %v6751 = vunpack.c.l.b16 %v6719
  %v6752 = vunpack.c.l.b16 %v6720
  %v6753 = vunpack.c.l.b16 %v6721
  %v6754 = vunpack.c.l.b16 %v6722
  %v6755 = vunpack.c.l.b16 %v6723
  %v6756 = vunpack.c.l.b16 %v6724
  %v6757 = vunpack.c.l.b16 %v6725
  %v6758 = vunpack.c.l.b16 %v6726
  %v6759 = vpack.c.b16 %v6744, %v6743
  %v6760 = vpack.c.b16 %v6746, %v6745
  %v6761 = vpack.c.b16 %v6748, %v6747
  %v6762 = vpack.c.b16 %v6750, %v6749
  %v6763 = vpack.c.b16 %v6752, %v6751
  %v6764 = vpack.c.b16 %v6754, %v6753
  %v6765 = vpack.c.b16 %v6756, %v6755
  %v6766 = vpack.c.b16 %v6758, %v6757
  %6775 = vmatprep.subr.bf16.mxu0 0
  %6776 = vmatpush1.bf16.msra.mxu0 %v6759
  %6777 = vmatprep.subr.bf16.mxu0 0
  %6778 = vmatpush1.bf16.msra.mxu0 %v6760
  %6779 = vmatprep.subr.bf16.mxu0 0
  %6780 = vmatpush1.bf16.msra.mxu0 %v6761
  %6781 = vmatprep.subr.bf16.mxu0 0
  %6782 = vmatpush1.bf16.msra.mxu0 %v6762
  %6783 = vmatprep.subr.bf16.mxu0 0
  %6784 = vmatpush1.bf16.msra.mxu0 %v6763
  %6785 = vmatprep.subr.bf16.mxu0 0
  %6786 = vmatpush1.bf16.msra.mxu0 %v6764
  %6787 = vmatprep.subr.bf16.mxu0 0
  %6788 = vmatpush1.bf16.msra.mxu0 %v6765
  %6789 = vmatprep.subr.bf16.mxu0 0
  %6790 = vmatpush1.bf16.msra.mxu0 %v6766
  %6791 = vmatprep.subr.bf16.mxu0 0
  %6792 = vmatpush1.bf16.msra.mxu0 0
  %6793 = vmatprep.subr.bf16.mxu0 0
  %6794 = vmatpush1.bf16.msra.mxu0 0
  %6795 = vmatprep.subr.bf16.mxu0 0
  %6796 = vmatpush1.bf16.msra.mxu0 0
  %6797 = vmatprep.subr.bf16.mxu0 0
  %6798 = vmatpush1.bf16.msra.mxu0 0
  %6799 = vmatprep.subr.bf16.mxu0 0
  %6800 = vmatpush1.bf16.msra.mxu0 0
  %6801 = vmatprep.subr.bf16.mxu0 0
  %6802 = vmatpush1.bf16.msra.mxu0 0
  %6803 = vmatprep.subr.bf16.mxu0 0
  %6804 = vmatpush1.bf16.msra.mxu0 0
  %6805 = vmatprep.subr.bf16.mxu0 0
  %6806 = vmatpush1.bf16.msra.mxu0 0
  %6807 = vmatprep.mubr.bf16.mxu0 0
  %6808 = vmatmul.mubr.bf16.gmra.mrb[0].mxu0 %v6703
  %v6809 = vpop.f32.mrb[0].mxu0
  %v6810 = vadd.f32 0.0, %v6809
  %v6811 = vpop.f32.mrb[0].mxu0
  %v6812 = vpop.f32.mrb[0].mxu0
  %v6813 = vadd.f32 0.0, %v6812
  %v6814 = vpop.f32.mrb[0].mxu0
  %6815 = vmatprep.mubr.bf16.mxu0 0
  %6816 = vmatmul.mubr.bf16.gmra.mrb[0].mxu0 %v6704
  %v6817 = vpop.f32.mrb[0].mxu0
  %v6818 = vadd.f32 0.0, %v6817
  %v6819 = vpop.f32.mrb[0].mxu0
  %v6820 = vpop.f32.mrb[0].mxu0
  %v6821 = vadd.f32 0.0, %v6820
  %v6822 = vpop.f32.mrb[0].mxu0
  %6823 = vmatprep.mubr.bf16.mxu0 0
  %6824 = vmatmul.mubr.bf16.gmra.mrb[0].mxu0 %v6705
  %v6825 = vpop.f32.mrb[0].mxu0
  %v6826 = vadd.f32 0.0, %v6825
  %v6827 = vpop.f32.mrb[0].mxu0
  %v6828 = vpop.f32.mrb[0].mxu0
  %v6829 = vadd.f32 0.0, %v6828
  %v6830 = vpop.f32.mrb[0].mxu0
  %6831 = vmatprep.mubr.bf16.mxu0 0
  %6832 = vmatmul.mubr.bf16.gmra.mrb[0].mxu0 %v6706
  %v6833 = vpop.f32.mrb[0].mxu0
  %v6834 = vadd.f32 0.0, %v6833
  %v6835 = vpop.f32.mrb[0].mxu0
  %v6836 = vpop.f32.mrb[0].mxu0
  %v6837 = vadd.f32 0.0, %v6836
  %v6838 = vpop.f32.mrb[0].mxu0
  %6839 = vmatprep.mubr.bf16.mxu0 0
  %6840 = vmatmul.mubr.bf16.gmra.mrb[0].mxu0 %v6707
  %v6841 = vpop.f32.mrb[0].mxu0
  %v6842 = vadd.f32 0.0, %v6841
  %v6843 = vpop.f32.mrb[0].mxu0
  %v6844 = vpop.f32.mrb[0].mxu0
  %v6845 = vadd.f32 0.0, %v6844
  %v6846 = vpop.f32.mrb[0].mxu0
  %6847 = vmatprep.mubr.bf16.mxu0 0
  %6848 = vmatmul.mubr.bf16.gmra.mrb[0].mxu0 %v6708
  %v6849 = vpop.f32.mrb[0].mxu0
  %v6850 = vadd.f32 0.0, %v6849
  %v6851 = vpop.f32.mrb[0].mxu0
  %v6852 = vpop.f32.mrb[0].mxu0
  %v6853 = vadd.f32 0.0, %v6852
  %v6854 = vpop.f32.mrb[0].mxu0
  %6855 = vmatprep.mubr.bf16.mxu0 0
  %6856 = vmatmul.mubr.bf16.gmra.mrb[0].mxu0 %v6709
  %v6857 = vpop.f32.mrb[0].mxu0
  %v6858 = vadd.f32 0.0, %v6857
  %v6859 = vpop.f32.mrb[0].mxu0
  %v6860 = vpop.f32.mrb[0].mxu0
  %v6861 = vpop.f32.mrb[0].mxu0
  %6862 = vdwg.mxu0
  %v6863 = vadd.f32 %v6339, %v6810
  %v6864 = vadd.f32 %v6340, %v6813
  %v6865 = vadd.f32 %v6341, %v6818
  %v6866 = vadd.f32 %v6342, %v6821
  %v6867 = vadd.f32 %v6343, %v6826
  %v6868 = vadd.f32 %v6344, %v6829
  %v6869 = vadd.f32 %v6345, %v6834
  %v6870 = vadd.f32 %v6346, %v6837
  %v6871 = vadd.f32 %v6347, %v6842
  %v6872 = vadd.f32 %v6348, %v6845
  %v6873 = vadd.f32 %v6349, %v6850
  %v6874 = vadd.f32 %v6350, %v6853
  %v6875 = vadd.f32 %v6351, %v6858
  %s6876 = scalar_lea.vmem %s3, 2496
  %v6877 = vld [vmem:[%s6876] sm:$0xff]
  %v6878 = vld [vmem:[%s6876 + $0x8] sm:$0xff]
  %v6879 = vld [vmem:[%s6876 + $0x10] sm:$0xff]
  %v6880 = vld [vmem:[%s6876 + $0x18] sm:$0xff]
  %v6881 = vld [vmem:[%s6876 + $0x20] sm:$0xff]
  %v6882 = vld [vmem:[%s6876 + $0x28] sm:$0xff]
  %v6883 = vld [vmem:[%s6876 + $0x30] sm:$0xff]
  %v6884 = vld [vmem:[%s6876 + $0x38] sm:$0xff]
  %v6885 = vld [vmem:[%s6876 + $0x40] sm:$0xff]
  %v6886 = vld [vmem:[%s6876 + $0x48] sm:$0xff]
  %v6887 = vld [vmem:[%s6876 + $0x50] sm:$0xff]
  %v6888 = vld [vmem:[%s6876 + $0x58] sm:$0xff]
  %v6889 = vld [vmem:[%s6876 + $0x60] sm:$0xff]
  %v6890 = vld [vmem:[%s6876 + $0x68] sm:$0xff]
  %v6891 = vld [vmem:[%s6876 + $0x70] sm:$0xff]
  %v6892 = vld [vmem:[%s6876 + $0x78] sm:$0xff]
  %v6893 = vld [vmem:[%s6876 + $0x80] sm:$0xff]
  %v6894 = vld [vmem:[%s6876 + $0x88] sm:$0xff]
  %v6895 = vld [vmem:[%s6876 + $0x90] sm:$0xff]
  %v6896 = vld [vmem:[%s6876 + $0x98] sm:$0xff]
  %v6897 = vld [vmem:[%s6876 + $0xa0] sm:$0xff]
  %v6898 = vld [vmem:[%s6876 + $0xa8] sm:$0xff]
  %v6899 = vld [vmem:[%s6876 + $0xb0] sm:$0xff]
  %v6900 = vld [vmem:[%s6876 + $0xb8] sm:$0xff]
  %v6901 = vld [vmem:[%s6876 + $0xc0] sm:$0xff]
  %v6902 = vld [vmem:[%s6876 + $0xc8] sm:$0xff]
  %v6929 = vunpack.c.l.b16 %v6877
  %v6930 = vunpack.c.h.b16 %v6877
  %v6931 = vunpack.c.l.b16 %v6878
  %v6932 = vunpack.c.h.b16 %v6878
  %v6933 = vunpack.c.l.b16 %v6879
  %v6934 = vunpack.c.h.b16 %v6879
  %v6935 = vunpack.c.l.b16 %v6880
  %v6936 = vunpack.c.h.b16 %v6880
  %v6937 = vunpack.c.l.b16 %v6881
  %v6938 = vunpack.c.h.b16 %v6881
  %v6939 = vunpack.c.l.b16 %v6882
  %v6940 = vunpack.c.h.b16 %v6882
  %v6941 = vunpack.c.l.b16 %v6883
  %v6942 = vunpack.c.h.b16 %v6883
  %v6943 = vunpack.c.l.b16 %v6884
  %v6944 = vunpack.c.h.b16 %v6884
  %v6945 = vunpack.c.l.b16 %v6885
  %v6946 = vunpack.c.h.b16 %v6885
  %v6947 = vunpack.c.l.b16 %v6886
  %v6948 = vunpack.c.h.b16 %v6886
  %v6949 = vunpack.c.l.b16 %v6887
  %v6950 = vunpack.c.h.b16 %v6887
  %v6951 = vunpack.c.l.b16 %v6888
  %v6952 = vunpack.c.h.b16 %v6888
  %v6953 = vunpack.c.l.b16 %v6889
  %v6954 = vunpack.c.h.b16 %v6889
  %v6955 = vunpack.c.l.b16 %v6890
  %v6956 = vunpack.c.h.b16 %v6890
  %v6957 = vunpack.c.l.b16 %v6891
  %v6958 = vunpack.c.h.b16 %v6891
  %v6959 = vunpack.c.l.b16 %v6892
  %v6960 = vunpack.c.h.b16 %v6892
  %v6961 = vunpack.c.l.b16 %v6893
  %v6962 = vunpack.c.h.b16 %v6893
  %v6963 = vunpack.c.l.b16 %v6894
  %v6964 = vunpack.c.h.b16 %v6894
  %v6965 = vunpack.c.l.b16 %v6895
  %v6966 = vunpack.c.h.b16 %v6895
  %v6967 = vunpack.c.l.b16 %v6896
  %v6968 = vunpack.c.h.b16 %v6896
  %v6969 = vunpack.c.l.b16 %v6897
  %v6970 = vunpack.c.h.b16 %v6897
  %v6971 = vunpack.c.l.b16 %v6898
  %v6972 = vunpack.c.h.b16 %v6898
  %v6973 = vunpack.c.l.b16 %v6899
  %v6974 = vunpack.c.h.b16 %v6899
  %v6975 = vunpack.c.l.b16 %v6900
  %v6976 = vunpack.c.h.b16 %v6900
  %v6977 = vunpack.c.l.b16 %v6901
  %v6978 = vunpack.c.h.b16 %v6901
  %v6979 = vunpack.c.l.b16 %v6902
  %v6980 = vunpack.c.h.b16 %v6902
  %v6981 = vpack.c.b16 %v6933, %v6929
  %v6982 = vpack.c.b16 %v6934, %v6930
  %v6983 = vpack.c.b16 %v6935, %v6931
  %v6984 = vpack.c.b16 %v6936, %v6932
  %v6985 = vpack.c.b16 %v6941, %v6937
  %v6986 = vpack.c.b16 %v6942, %v6938
  %v6987 = vpack.c.b16 %v6943, %v6939
  %v6988 = vpack.c.b16 %v6944, %v6940
  %v6989 = vpack.c.b16 %v6949, %v6945
  %v6990 = vpack.c.b16 %v6950, %v6946
  %v6991 = vpack.c.b16 %v6951, %v6947
  %v6992 = vpack.c.b16 %v6952, %v6948
  %v6993 = vpack.c.b16 %v6957, %v6953
  %v6994 = vpack.c.b16 %v6958, %v6954
  %v6995 = vpack.c.b16 %v6959, %v6955
  %v6996 = vpack.c.b16 %v6960, %v6956
  %v6997 = vpack.c.b16 %v6965, %v6961
  %v6998 = vpack.c.b16 %v6966, %v6962
  %v6999 = vpack.c.b16 %v6967, %v6963
  %v7000 = vpack.c.b16 %v6968, %v6964
  %v7001 = vpack.c.b16 %v6973, %v6969
  %v7002 = vpack.c.b16 %v6974, %v6970
  %v7003 = vpack.c.b16 %v6975, %v6971
  %v7004 = vpack.c.b16 %v6976, %v6972
  %v7005 = vpack.c.b16 %v6977, %v6977
  %v7006 = vpack.c.b16 %v6978, %v6978
  %v7007 = vpack.c.b16 %v6979, %v6979
  %v7008 = vpack.c.b16 %v6980, %v6980
  %v7031 = vsel %vm764, %v6984, 0
  %v7034 = vsel %vm764, %v6988, 0
  %v7037 = vsel %vm764, %v6992, 0
  %v7040 = vsel %vm764, %v6996, 0
  %v7043 = vsel %vm764, %v7000, 0
  %v7046 = vsel %vm764, %v7004, 0
  %v7049 = vsel %vm764, %v7008, 0
  %7051 = vmatprep.subr.bf16.mxu0 0
  %7052 = vmatpush1.bf16.msra.mxu0 %v586
  %7053 = vmatprep.subr.bf16.mxu0 0
  %7054 = vmatpush1.bf16.msra.mxu0 %v587
  %7055 = vmatprep.subr.bf16.mxu0 0
  %7056 = vmatpush1.bf16.msra.mxu0 %v588
  %7057 = vmatprep.subr.bf16.mxu0 0
  %7058 = vmatpush1.bf16.msra.mxu0 %v589
  %7059 = vmatprep.subr.bf16.mxu0 0
  %7060 = vmatpush1.bf16.msra.mxu0 %v590
  %7061 = vmatprep.subr.bf16.mxu0 0
  %7062 = vmatpush1.bf16.msra.mxu0 %v591
  %7063 = vmatprep.subr.bf16.mxu0 0
  %7064 = vmatpush1.bf16.msra.mxu0 %v592
  %7065 = vmatprep.subr.bf16.mxu0 0
  %7066 = vmatpush1.bf16.msra.mxu0 %v593
  %7067 = vmatprep.subr.bf16.mxu0 0
  %7068 = vmatpush1.bf16.msra.mxu0 %v594
  %7069 = vmatprep.subr.bf16.mxu0 0
  %7070 = vmatpush1.bf16.msra.mxu0 %v595
  %7071 = vmatprep.subr.bf16.mxu0 0
  %7072 = vmatpush1.bf16.msra.mxu0 %v596
  %7073 = vmatprep.subr.bf16.mxu0 0
  %7074 = vmatpush1.bf16.msra.mxu0 %v597
  %7075 = vmatprep.subr.bf16.mxu0 0
  %7076 = vmatpush1.bf16.msra.mxu0 %v598
  %7077 = vmatprep.subr.bf16.mxu0 0
  %7078 = vmatpush1.bf16.msra.mxu0 %v599
  %7079 = vmatprep.subr.bf16.mxu0 0
  %7080 = vmatpush1.bf16.msra.mxu0 %v600
  %7081 = vmatprep.subr.bf16.mxu0 0
  %7082 = vmatpush1.bf16.msra.mxu0 %v601
  %7083 = vmatprep.mubr.bf16.mxu0 %v6982
  %7084 = vmatmul.mubr.bf16.gmra.mrb[0].mxu0 %v6981
  %v7085 = vpop.f32.mrb[0].mxu0
  %v7086 = vadd.f32 0.0, %v7085
  %v7087 = vpop.f32.mrb[0].mxu0
  %v7088 = vpop.f32.mrb[0].mxu0
  %v7089 = vadd.f32 0.0, %v7088
  %v7090 = vpop.f32.mrb[0].mxu0
  %7091 = vmatprep.mubr.bf16.mxu0 %v6986
  %7092 = vmatmul.mubr.bf16.gmra.mrb[0].mxu0 %v6985
  %v7093 = vpop.f32.mrb[0].mxu0
  %v7094 = vadd.f32 0.0, %v7093
  %v7095 = vpop.f32.mrb[0].mxu0
  %v7096 = vpop.f32.mrb[0].mxu0
  %v7097 = vadd.f32 0.0, %v7096
  %v7098 = vpop.f32.mrb[0].mxu0
  %7099 = vmatprep.mubr.bf16.mxu0 %v6990
  %7100 = vmatmul.mubr.bf16.gmra.mrb[0].mxu0 %v6989
  %v7101 = vpop.f32.mrb[0].mxu0
  %v7102 = vadd.f32 0.0, %v7101
  %v7103 = vpop.f32.mrb[0].mxu0
  %v7104 = vpop.f32.mrb[0].mxu0
  %v7105 = vadd.f32 0.0, %v7104
  %v7106 = vpop.f32.mrb[0].mxu0
  %7107 = vmatprep.mubr.bf16.mxu0 %v6994
  %7108 = vmatmul.mubr.bf16.gmra.mrb[0].mxu0 %v6993
  %v7109 = vpop.f32.mrb[0].mxu0
  %v7110 = vadd.f32 0.0, %v7109
  %v7111 = vpop.f32.mrb[0].mxu0
  %v7112 = vpop.f32.mrb[0].mxu0
  %v7113 = vadd.f32 0.0, %v7112
  %v7114 = vpop.f32.mrb[0].mxu0
  %7115 = vmatprep.mubr.bf16.mxu0 %v6998
  %7116 = vmatmul.mubr.bf16.gmra.mrb[0].mxu0 %v6997
  %v7117 = vpop.f32.mrb[0].mxu0
  %v7118 = vadd.f32 0.0, %v7117
  %v7119 = vpop.f32.mrb[0].mxu0
  %v7120 = vpop.f32.mrb[0].mxu0
  %v7121 = vadd.f32 0.0, %v7120
  %v7122 = vpop.f32.mrb[0].mxu0
  %7123 = vmatprep.mubr.bf16.mxu0 %v7002
  %7124 = vmatmul.mubr.bf16.gmra.mrb[0].mxu0 %v7001
  %v7125 = vpop.f32.mrb[0].mxu0
  %v7126 = vadd.f32 0.0, %v7125
  %v7127 = vpop.f32.mrb[0].mxu0
  %v7128 = vpop.f32.mrb[0].mxu0
  %v7129 = vadd.f32 0.0, %v7128
  %v7130 = vpop.f32.mrb[0].mxu0
  %7131 = vmatprep.mubr.bf16.mxu0 %v7006
  %7132 = vmatmul.mubr.bf16.gmra.mrb[0].mxu0 %v7005
  %v7133 = vpop.f32.mrb[0].mxu0
  %v7134 = vadd.f32 0.0, %v7133
  %v7135 = vpop.f32.mrb[0].mxu0
  %v7136 = vpop.f32.mrb[0].mxu0
  %v7137 = vpop.f32.mrb[0].mxu0
  %7138 = vdwg.mxu0
  %7139 = vmatprep.subr.bf16.mxu0 0
  %7140 = vmatpush1.bf16.msra.mxu0 %v602
  %7141 = vmatprep.subr.bf16.mxu0 0
  %7142 = vmatpush1.bf16.msra.mxu0 %v603
  %7143 = vmatprep.subr.bf16.mxu0 0
  %7144 = vmatpush1.bf16.msra.mxu0 %v604
  %7145 = vmatprep.subr.bf16.mxu0 0
  %7146 = vmatpush1.bf16.msra.mxu0 %v605
  %7147 = vmatprep.subr.bf16.mxu0 0
  %7148 = vmatpush1.bf16.msra.mxu0 %v606
  %7149 = vmatprep.subr.bf16.mxu0 0
  %7150 = vmatpush1.bf16.msra.mxu0 %v607
  %7151 = vmatprep.subr.bf16.mxu0 0
  %7152 = vmatpush1.bf16.msra.mxu0 %v608
  %7153 = vmatprep.subr.bf16.mxu0 0
  %7154 = vmatpush1.bf16.msra.mxu0 %v609
  %7155 = vmatprep.subr.bf16.mxu0 0
  %7156 = vmatpush1.bf16.msra.mxu0 %v788
  %7157 = vmatprep.subr.bf16.mxu0 0
  %7158 = vmatpush1.bf16.msra.mxu0 0
  %7159 = vmatprep.subr.bf16.mxu0 0
  %7160 = vmatpush1.bf16.msra.mxu0 0
  %7161 = vmatprep.subr.bf16.mxu0 0
  %7162 = vmatpush1.bf16.msra.mxu0 0
  %7163 = vmatprep.subr.bf16.mxu0 0
  %7164 = vmatpush1.bf16.msra.mxu0 0
  %7165 = vmatprep.subr.bf16.mxu0 0
  %7166 = vmatpush1.bf16.msra.mxu0 0
  %7167 = vmatprep.subr.bf16.mxu0 0
  %7168 = vmatpush1.bf16.msra.mxu0 0
  %7169 = vmatprep.subr.bf16.mxu0 0
  %7170 = vmatpush1.bf16.msra.mxu0 0
  %7171 = vmatprep.mubr.bf16.mxu0 %v7031
  %7172 = vmatmul.mubr.bf16.gmra.mrb[0].mxu0 %v6983
  %v7173 = vpop.f32.mrb[0].mxu0
  %v7174 = vadd.f32 %v7086, %v7173
  %v7175 = vpop.f32.mrb[0].mxu0
  %v7176 = vpop.f32.mrb[0].mxu0
  %v7177 = vadd.f32 %v7089, %v7176
  %v7178 = vpop.f32.mrb[0].mxu0
  %7179 = vmatprep.mubr.bf16.mxu0 %v7034
  %7180 = vmatmul.mubr.bf16.gmra.mrb[0].mxu0 %v6987
  %v7181 = vpop.f32.mrb[0].mxu0
  %v7182 = vadd.f32 %v7094, %v7181
  %v7183 = vpop.f32.mrb[0].mxu0
  %v7184 = vpop.f32.mrb[0].mxu0
  %v7185 = vadd.f32 %v7097, %v7184
  %v7186 = vpop.f32.mrb[0].mxu0
  %7187 = vmatprep.mubr.bf16.mxu0 %v7037
  %7188 = vmatmul.mubr.bf16.gmra.mrb[0].mxu0 %v6991
  %v7189 = vpop.f32.mrb[0].mxu0
  %v7190 = vadd.f32 %v7102, %v7189
  %v7191 = vpop.f32.mrb[0].mxu0
  %v7192 = vpop.f32.mrb[0].mxu0
  %v7193 = vadd.f32 %v7105, %v7192
  %v7194 = vpop.f32.mrb[0].mxu0
  %7195 = vmatprep.mubr.bf16.mxu0 %v7040
  %7196 = vmatmul.mubr.bf16.gmra.mrb[0].mxu0 %v6995
  %v7197 = vpop.f32.mrb[0].mxu0
  %v7198 = vadd.f32 %v7110, %v7197
  %v7199 = vpop.f32.mrb[0].mxu0
  %v7200 = vpop.f32.mrb[0].mxu0
  %v7201 = vadd.f32 %v7113, %v7200
  %v7202 = vpop.f32.mrb[0].mxu0
  %7203 = vmatprep.mubr.bf16.mxu0 %v7043
  %7204 = vmatmul.mubr.bf16.gmra.mrb[0].mxu0 %v6999
  %v7205 = vpop.f32.mrb[0].mxu0
  %v7206 = vadd.f32 %v7118, %v7205
  %v7207 = vpop.f32.mrb[0].mxu0
  %v7208 = vpop.f32.mrb[0].mxu0
  %v7209 = vadd.f32 %v7121, %v7208
  %v7210 = vpop.f32.mrb[0].mxu0
  %7211 = vmatprep.mubr.bf16.mxu0 %v7046
  %7212 = vmatmul.mubr.bf16.gmra.mrb[0].mxu0 %v7003
  %v7213 = vpop.f32.mrb[0].mxu0
  %v7214 = vadd.f32 %v7126, %v7213
  %v7215 = vpop.f32.mrb[0].mxu0
  %v7216 = vpop.f32.mrb[0].mxu0
  %v7217 = vadd.f32 %v7129, %v7216
  %v7218 = vpop.f32.mrb[0].mxu0
  %7219 = vmatprep.mubr.bf16.mxu0 %v7049
  %7220 = vmatmul.mubr.bf16.gmra.mrb[0].mxu0 %v7007
  %v7221 = vpop.f32.mrb[0].mxu0
  %v7222 = vadd.f32 %v7134, %v7221
  %v7223 = vpop.f32.mrb[0].mxu0
  %v7224 = vpop.f32.mrb[0].mxu0
  %v7225 = vpop.f32.mrb[0].mxu0
  %7226 = vdwg.mxu0
  %v7227 = vpack.c.bf16 %v7177, %v7174
  %v7228 = vpack.c.bf16 %v7185, %v7182
  %v7229 = vpack.c.bf16 %v7193, %v7190
  %v7230 = vpack.c.bf16 %v7201, %v7198
  %v7231 = vpack.c.bf16 %v7209, %v7206
  %v7232 = vpack.c.bf16 %v7217, %v7214
  %v7233 = vpack.c.bf16 %v7222, %v7222
  %s7234 = scalar_lea.vmem %s4, 768
  %v7235 = vld [vmem:[%s7234] sm:$0xf]
  %v7236 = vld [vmem:[%s7234 + $0x4] sm:$0xf]
  %v7237 = vld [vmem:[%s7234 + $0x8] sm:$0xf]
  %v7238 = vld [vmem:[%s7234 + $0xc] sm:$0xf]
  %v7239 = vld [vmem:[%s7234 + $0x10] sm:$0xf]
  %v7240 = vld [vmem:[%s7234 + $0x14] sm:$0xf]
  %v7241 = vld [vmem:[%s7234 + $0x18] sm:$0xf]
  %v7242 = vld [vmem:[%s7234 + $0x1c] sm:$0xf]
  %v7243 = vld [vmem:[%s7234 + $0x20] sm:$0xf]
  %v7244 = vld [vmem:[%s7234 + $0x24] sm:$0xf]
  %v7245 = vld [vmem:[%s7234 + $0x28] sm:$0xf]
  %v7246 = vld [vmem:[%s7234 + $0x2c] sm:$0xf]
  %v7247 = vld [vmem:[%s7234 + $0x30] sm:$0xf]
  %v7248 = vld [vmem:[%s7234 + $0x34] sm:$0xf]
  %v7249 = vld [vmem:[%s7234 + $0x38] sm:$0xf]
  %v7250 = vld [vmem:[%s7234 + $0x3c] sm:$0xf]
  %v7267 = vunpack.c.l.b16 %v7235
  %v7268 = vunpack.c.l.b16 %v7236
  %v7269 = vunpack.c.l.b16 %v7237
  %v7270 = vunpack.c.l.b16 %v7238
  %v7271 = vunpack.c.l.b16 %v7239
  %v7272 = vunpack.c.l.b16 %v7240
  %v7273 = vunpack.c.l.b16 %v7241
  %v7274 = vunpack.c.l.b16 %v7242
  %v7275 = vunpack.c.l.b16 %v7243
  %v7276 = vunpack.c.l.b16 %v7244
  %v7277 = vunpack.c.l.b16 %v7245
  %v7278 = vunpack.c.l.b16 %v7246
  %v7279 = vunpack.c.l.b16 %v7247
  %v7280 = vunpack.c.l.b16 %v7248
  %v7281 = vunpack.c.l.b16 %v7249
  %v7282 = vunpack.c.l.b16 %v7250
  %v7283 = vpack.c.b16 %v7268, %v7267
  %v7284 = vpack.c.b16 %v7270, %v7269
  %v7285 = vpack.c.b16 %v7272, %v7271
  %v7286 = vpack.c.b16 %v7274, %v7273
  %v7287 = vpack.c.b16 %v7276, %v7275
  %v7288 = vpack.c.b16 %v7278, %v7277
  %v7289 = vpack.c.b16 %v7280, %v7279
  %v7290 = vpack.c.b16 %v7282, %v7281
  %7299 = vmatprep.subr.bf16.mxu0 0
  %7300 = vmatpush1.bf16.msra.mxu0 %v7283
  %7301 = vmatprep.subr.bf16.mxu0 0
  %7302 = vmatpush1.bf16.msra.mxu0 %v7284
  %7303 = vmatprep.subr.bf16.mxu0 0
  %7304 = vmatpush1.bf16.msra.mxu0 %v7285
  %7305 = vmatprep.subr.bf16.mxu0 0
  %7306 = vmatpush1.bf16.msra.mxu0 %v7286
  %7307 = vmatprep.subr.bf16.mxu0 0
  %7308 = vmatpush1.bf16.msra.mxu0 %v7287
  %7309 = vmatprep.subr.bf16.mxu0 0
  %7310 = vmatpush1.bf16.msra.mxu0 %v7288
  %7311 = vmatprep.subr.bf16.mxu0 0
  %7312 = vmatpush1.bf16.msra.mxu0 %v7289
  %7313 = vmatprep.subr.bf16.mxu0 0
  %7314 = vmatpush1.bf16.msra.mxu0 %v7290
  %7315 = vmatprep.subr.bf16.mxu0 0
  %7316 = vmatpush1.bf16.msra.mxu0 0
  %7317 = vmatprep.subr.bf16.mxu0 0
  %7318 = vmatpush1.bf16.msra.mxu0 0
  %7319 = vmatprep.subr.bf16.mxu0 0
  %7320 = vmatpush1.bf16.msra.mxu0 0
  %7321 = vmatprep.subr.bf16.mxu0 0
  %7322 = vmatpush1.bf16.msra.mxu0 0
  %7323 = vmatprep.subr.bf16.mxu0 0
  %7324 = vmatpush1.bf16.msra.mxu0 0
  %7325 = vmatprep.subr.bf16.mxu0 0
  %7326 = vmatpush1.bf16.msra.mxu0 0
  %7327 = vmatprep.subr.bf16.mxu0 0
  %7328 = vmatpush1.bf16.msra.mxu0 0
  %7329 = vmatprep.subr.bf16.mxu0 0
  %7330 = vmatpush1.bf16.msra.mxu0 0
  %7331 = vmatprep.mubr.bf16.mxu0 0
  %7332 = vmatmul.mubr.bf16.gmra.mrb[0].mxu0 %v7227
  %v7333 = vpop.f32.mrb[0].mxu0
  %v7334 = vadd.f32 0.0, %v7333
  %v7335 = vpop.f32.mrb[0].mxu0
  %v7336 = vpop.f32.mrb[0].mxu0
  %v7337 = vadd.f32 0.0, %v7336
  %v7338 = vpop.f32.mrb[0].mxu0
  %7339 = vmatprep.mubr.bf16.mxu0 0
  %7340 = vmatmul.mubr.bf16.gmra.mrb[0].mxu0 %v7228
  %v7341 = vpop.f32.mrb[0].mxu0
  %v7342 = vadd.f32 0.0, %v7341
  %v7343 = vpop.f32.mrb[0].mxu0
  %v7344 = vpop.f32.mrb[0].mxu0
  %v7345 = vadd.f32 0.0, %v7344
  %v7346 = vpop.f32.mrb[0].mxu0
  %7347 = vmatprep.mubr.bf16.mxu0 0
  %7348 = vmatmul.mubr.bf16.gmra.mrb[0].mxu0 %v7229
  %v7349 = vpop.f32.mrb[0].mxu0
  %v7350 = vadd.f32 0.0, %v7349
  %v7351 = vpop.f32.mrb[0].mxu0
  %v7352 = vpop.f32.mrb[0].mxu0
  %v7353 = vadd.f32 0.0, %v7352
  %v7354 = vpop.f32.mrb[0].mxu0
  %7355 = vmatprep.mubr.bf16.mxu0 0
  %7356 = vmatmul.mubr.bf16.gmra.mrb[0].mxu0 %v7230
  %v7357 = vpop.f32.mrb[0].mxu0
  %v7358 = vadd.f32 0.0, %v7357
  %v7359 = vpop.f32.mrb[0].mxu0
  %v7360 = vpop.f32.mrb[0].mxu0
  %v7361 = vadd.f32 0.0, %v7360
  %v7362 = vpop.f32.mrb[0].mxu0
  %7363 = vmatprep.mubr.bf16.mxu0 0
  %7364 = vmatmul.mubr.bf16.gmra.mrb[0].mxu0 %v7231
  %v7365 = vpop.f32.mrb[0].mxu0
  %v7366 = vadd.f32 0.0, %v7365
  %v7367 = vpop.f32.mrb[0].mxu0
  %v7368 = vpop.f32.mrb[0].mxu0
  %v7369 = vadd.f32 0.0, %v7368
  %v7370 = vpop.f32.mrb[0].mxu0
  %7371 = vmatprep.mubr.bf16.mxu0 0
  %7372 = vmatmul.mubr.bf16.gmra.mrb[0].mxu0 %v7232
  %v7373 = vpop.f32.mrb[0].mxu0
  %v7374 = vadd.f32 0.0, %v7373
  %v7375 = vpop.f32.mrb[0].mxu0
  %v7376 = vpop.f32.mrb[0].mxu0
  %v7377 = vadd.f32 0.0, %v7376
  %v7378 = vpop.f32.mrb[0].mxu0
  %7379 = vmatprep.mubr.bf16.mxu0 0
  %7380 = vmatmul.mubr.bf16.gmra.mrb[0].mxu0 %v7233
  %v7381 = vpop.f32.mrb[0].mxu0
  %v7382 = vadd.f32 0.0, %v7381
  %v7383 = vpop.f32.mrb[0].mxu0
  %v7384 = vpop.f32.mrb[0].mxu0
  %v7385 = vpop.f32.mrb[0].mxu0
  %7386 = vdwg.mxu0
  %v7387 = vadd.f32 %v6863, %v7334
  %v7388 = vadd.f32 %v6864, %v7337
  %v7389 = vadd.f32 %v6865, %v7342
  %v7390 = vadd.f32 %v6866, %v7345
  %v7391 = vadd.f32 %v6867, %v7350
  %v7392 = vadd.f32 %v6868, %v7353
  %v7393 = vadd.f32 %v6869, %v7358
  %v7394 = vadd.f32 %v6870, %v7361
  %v7395 = vadd.f32 %v6871, %v7366
  %v7396 = vadd.f32 %v6872, %v7369
  %v7397 = vadd.f32 %v6873, %v7374
  %v7398 = vadd.f32 %v6874, %v7377
  %v7399 = vadd.f32 %v6875, %v7382
  %s7400 = scalar_lea.vmem %s3, 2704
  %v7401 = vld [vmem:[%s7400] sm:$0xff]
  %v7402 = vld [vmem:[%s7400 + $0x8] sm:$0xff]
  %v7403 = vld [vmem:[%s7400 + $0x10] sm:$0xff]
  %v7404 = vld [vmem:[%s7400 + $0x18] sm:$0xff]
  %v7405 = vld [vmem:[%s7400 + $0x20] sm:$0xff]
  %v7406 = vld [vmem:[%s7400 + $0x28] sm:$0xff]
  %v7407 = vld [vmem:[%s7400 + $0x30] sm:$0xff]
  %v7408 = vld [vmem:[%s7400 + $0x38] sm:$0xff]
  %v7409 = vld [vmem:[%s7400 + $0x40] sm:$0xff]
  %v7410 = vld [vmem:[%s7400 + $0x48] sm:$0xff]
  %v7411 = vld [vmem:[%s7400 + $0x50] sm:$0xff]
  %v7412 = vld [vmem:[%s7400 + $0x58] sm:$0xff]
  %v7413 = vld [vmem:[%s7400 + $0x60] sm:$0xff]
  %v7414 = vld [vmem:[%s7400 + $0x68] sm:$0xff]
  %v7415 = vld [vmem:[%s7400 + $0x70] sm:$0xff]
  %v7416 = vld [vmem:[%s7400 + $0x78] sm:$0xff]
  %v7417 = vld [vmem:[%s7400 + $0x80] sm:$0xff]
  %v7418 = vld [vmem:[%s7400 + $0x88] sm:$0xff]
  %v7419 = vld [vmem:[%s7400 + $0x90] sm:$0xff]
  %v7420 = vld [vmem:[%s7400 + $0x98] sm:$0xff]
  %v7421 = vld [vmem:[%s7400 + $0xa0] sm:$0xff]
  %v7422 = vld [vmem:[%s7400 + $0xa8] sm:$0xff]
  %v7423 = vld [vmem:[%s7400 + $0xb0] sm:$0xff]
  %v7424 = vld [vmem:[%s7400 + $0xb8] sm:$0xff]
  %v7425 = vld [vmem:[%s7400 + $0xc0] sm:$0xff]
  %v7426 = vld [vmem:[%s7400 + $0xc8] sm:$0xff]
  %v7453 = vunpack.c.l.b16 %v7401
  %v7454 = vunpack.c.h.b16 %v7401
  %v7455 = vunpack.c.l.b16 %v7402
  %v7456 = vunpack.c.h.b16 %v7402
  %v7457 = vunpack.c.l.b16 %v7403
  %v7458 = vunpack.c.h.b16 %v7403
  %v7459 = vunpack.c.l.b16 %v7404
  %v7460 = vunpack.c.h.b16 %v7404
  %v7461 = vunpack.c.l.b16 %v7405
  %v7462 = vunpack.c.h.b16 %v7405
  %v7463 = vunpack.c.l.b16 %v7406
  %v7464 = vunpack.c.h.b16 %v7406
  %v7465 = vunpack.c.l.b16 %v7407
  %v7466 = vunpack.c.h.b16 %v7407
  %v7467 = vunpack.c.l.b16 %v7408
  %v7468 = vunpack.c.h.b16 %v7408
  %v7469 = vunpack.c.l.b16 %v7409
  %v7470 = vunpack.c.h.b16 %v7409
  %v7471 = vunpack.c.l.b16 %v7410
  %v7472 = vunpack.c.h.b16 %v7410
  %v7473 = vunpack.c.l.b16 %v7411
  %v7474 = vunpack.c.h.b16 %v7411
  %v7475 = vunpack.c.l.b16 %v7412
  %v7476 = vunpack.c.h.b16 %v7412
  %v7477 = vunpack.c.l.b16 %v7413
  %v7478 = vunpack.c.h.b16 %v7413
  %v7479 = vunpack.c.l.b16 %v7414
  %v7480 = vunpack.c.h.b16 %v7414
  %v7481 = vunpack.c.l.b16 %v7415
  %v7482 = vunpack.c.h.b16 %v7415
  %v7483 = vunpack.c.l.b16 %v7416
  %v7484 = vunpack.c.h.b16 %v7416
  %v7485 = vunpack.c.l.b16 %v7417
  %v7486 = vunpack.c.h.b16 %v7417
  %v7487 = vunpack.c.l.b16 %v7418
  %v7488 = vunpack.c.h.b16 %v7418
  %v7489 = vunpack.c.l.b16 %v7419
  %v7490 = vunpack.c.h.b16 %v7419
  %v7491 = vunpack.c.l.b16 %v7420
  %v7492 = vunpack.c.h.b16 %v7420
  %v7493 = vunpack.c.l.b16 %v7421
  %v7494 = vunpack.c.h.b16 %v7421
  %v7495 = vunpack.c.l.b16 %v7422
  %v7496 = vunpack.c.h.b16 %v7422
  %v7497 = vunpack.c.l.b16 %v7423
  %v7498 = vunpack.c.h.b16 %v7423
  %v7499 = vunpack.c.l.b16 %v7424
  %v7500 = vunpack.c.h.b16 %v7424
  %v7501 = vunpack.c.l.b16 %v7425
  %v7502 = vunpack.c.h.b16 %v7425
  %v7503 = vunpack.c.l.b16 %v7426
  %v7504 = vunpack.c.h.b16 %v7426
  %v7505 = vpack.c.b16 %v7457, %v7453
  %v7506 = vpack.c.b16 %v7458, %v7454
  %v7507 = vpack.c.b16 %v7459, %v7455
  %v7508 = vpack.c.b16 %v7460, %v7456
  %v7509 = vpack.c.b16 %v7465, %v7461
  %v7510 = vpack.c.b16 %v7466, %v7462
  %v7511 = vpack.c.b16 %v7467, %v7463
  %v7512 = vpack.c.b16 %v7468, %v7464
  %v7513 = vpack.c.b16 %v7473, %v7469
  %v7514 = vpack.c.b16 %v7474, %v7470
  %v7515 = vpack.c.b16 %v7475, %v7471
  %v7516 = vpack.c.b16 %v7476, %v7472
  %v7517 = vpack.c.b16 %v7481, %v7477
  %v7518 = vpack.c.b16 %v7482, %v7478
  %v7519 = vpack.c.b16 %v7483, %v7479
  %v7520 = vpack.c.b16 %v7484, %v7480
  %v7521 = vpack.c.b16 %v7489, %v7485
  %v7522 = vpack.c.b16 %v7490, %v7486
  %v7523 = vpack.c.b16 %v7491, %v7487
  %v7524 = vpack.c.b16 %v7492, %v7488
  %v7525 = vpack.c.b16 %v7497, %v7493
  %v7526 = vpack.c.b16 %v7498, %v7494
  %v7527 = vpack.c.b16 %v7499, %v7495
  %v7528 = vpack.c.b16 %v7500, %v7496
  %v7529 = vpack.c.b16 %v7501, %v7501
  %v7530 = vpack.c.b16 %v7502, %v7502
  %v7531 = vpack.c.b16 %v7503, %v7503
  %v7532 = vpack.c.b16 %v7504, %v7504
  %v7555 = vsel %vm764, %v7508, 0
  %v7558 = vsel %vm764, %v7512, 0
  %v7561 = vsel %vm764, %v7516, 0
  %v7564 = vsel %vm764, %v7520, 0
  %v7567 = vsel %vm764, %v7524, 0
  %v7570 = vsel %vm764, %v7528, 0
  %v7573 = vsel %vm764, %v7532, 0
  %7575 = vmatprep.subr.bf16.mxu0 0
  %7576 = vmatpush1.bf16.msra.mxu0 %v586
  %7577 = vmatprep.subr.bf16.mxu0 0
  %7578 = vmatpush1.bf16.msra.mxu0 %v587
  %7579 = vmatprep.subr.bf16.mxu0 0
  %7580 = vmatpush1.bf16.msra.mxu0 %v588
  %7581 = vmatprep.subr.bf16.mxu0 0
  %7582 = vmatpush1.bf16.msra.mxu0 %v589
  %7583 = vmatprep.subr.bf16.mxu0 0
  %7584 = vmatpush1.bf16.msra.mxu0 %v590
  %7585 = vmatprep.subr.bf16.mxu0 0
  %7586 = vmatpush1.bf16.msra.mxu0 %v591
  %7587 = vmatprep.subr.bf16.mxu0 0
  %7588 = vmatpush1.bf16.msra.mxu0 %v592
  %7589 = vmatprep.subr.bf16.mxu0 0
  %7590 = vmatpush1.bf16.msra.mxu0 %v593
  %7591 = vmatprep.subr.bf16.mxu0 0
  %7592 = vmatpush1.bf16.msra.mxu0 %v594
  %7593 = vmatprep.subr.bf16.mxu0 0
  %7594 = vmatpush1.bf16.msra.mxu0 %v595
  %7595 = vmatprep.subr.bf16.mxu0 0
  %7596 = vmatpush1.bf16.msra.mxu0 %v596
  %7597 = vmatprep.subr.bf16.mxu0 0
  %7598 = vmatpush1.bf16.msra.mxu0 %v597
  %7599 = vmatprep.subr.bf16.mxu0 0
  %7600 = vmatpush1.bf16.msra.mxu0 %v598
  %7601 = vmatprep.subr.bf16.mxu0 0
  %7602 = vmatpush1.bf16.msra.mxu0 %v599
  %7603 = vmatprep.subr.bf16.mxu0 0
  %7604 = vmatpush1.bf16.msra.mxu0 %v600
  %7605 = vmatprep.subr.bf16.mxu0 0
  %7606 = vmatpush1.bf16.msra.mxu0 %v601
  %7607 = vmatprep.mubr.bf16.mxu0 %v7506
  %7608 = vmatmul.mubr.bf16.gmra.mrb[0].mxu0 %v7505
  %v7609 = vpop.f32.mrb[0].mxu0
  %v7610 = vadd.f32 0.0, %v7609
  %v7611 = vpop.f32.mrb[0].mxu0
  %v7612 = vpop.f32.mrb[0].mxu0
  %v7613 = vadd.f32 0.0, %v7612
  %v7614 = vpop.f32.mrb[0].mxu0
  %7615 = vmatprep.mubr.bf16.mxu0 %v7510
  %7616 = vmatmul.mubr.bf16.gmra.mrb[0].mxu0 %v7509
  %v7617 = vpop.f32.mrb[0].mxu0
  %v7618 = vadd.f32 0.0, %v7617
  %v7619 = vpop.f32.mrb[0].mxu0
  %v7620 = vpop.f32.mrb[0].mxu0
  %v7621 = vadd.f32 0.0, %v7620
  %v7622 = vpop.f32.mrb[0].mxu0
  %7623 = vmatprep.mubr.bf16.mxu0 %v7514
  %7624 = vmatmul.mubr.bf16.gmra.mrb[0].mxu0 %v7513
  %v7625 = vpop.f32.mrb[0].mxu0
  %v7626 = vadd.f32 0.0, %v7625
  %v7627 = vpop.f32.mrb[0].mxu0
  %v7628 = vpop.f32.mrb[0].mxu0
  %v7629 = vadd.f32 0.0, %v7628
  %v7630 = vpop.f32.mrb[0].mxu0
  %7631 = vmatprep.mubr.bf16.mxu0 %v7518
  %7632 = vmatmul.mubr.bf16.gmra.mrb[0].mxu0 %v7517
  %v7633 = vpop.f32.mrb[0].mxu0
  %v7634 = vadd.f32 0.0, %v7633
  %v7635 = vpop.f32.mrb[0].mxu0
  %v7636 = vpop.f32.mrb[0].mxu0
  %v7637 = vadd.f32 0.0, %v7636
  %v7638 = vpop.f32.mrb[0].mxu0
  %7639 = vmatprep.mubr.bf16.mxu0 %v7522
  %7640 = vmatmul.mubr.bf16.gmra.mrb[0].mxu0 %v7521
  %v7641 = vpop.f32.mrb[0].mxu0
  %v7642 = vadd.f32 0.0, %v7641
  %v7643 = vpop.f32.mrb[0].mxu0
  %v7644 = vpop.f32.mrb[0].mxu0
  %v7645 = vadd.f32 0.0, %v7644
  %v7646 = vpop.f32.mrb[0].mxu0
  %7647 = vmatprep.mubr.bf16.mxu0 %v7526
  %7648 = vmatmul.mubr.bf16.gmra.mrb[0].mxu0 %v7525
  %v7649 = vpop.f32.mrb[0].mxu0
  %v7650 = vadd.f32 0.0, %v7649
  %v7651 = vpop.f32.mrb[0].mxu0
  %v7652 = vpop.f32.mrb[0].mxu0
  %v7653 = vadd.f32 0.0, %v7652
  %v7654 = vpop.f32.mrb[0].mxu0
  %7655 = vmatprep.mubr.bf16.mxu0 %v7530
  %7656 = vmatmul.mubr.bf16.gmra.mrb[0].mxu0 %v7529
  %v7657 = vpop.f32.mrb[0].mxu0
  %v7658 = vadd.f32 0.0, %v7657
  %v7659 = vpop.f32.mrb[0].mxu0
  %v7660 = vpop.f32.mrb[0].mxu0
  %v7661 = vpop.f32.mrb[0].mxu0
  %7662 = vdwg.mxu0
  %7663 = vmatprep.subr.bf16.mxu0 0
  %7664 = vmatpush1.bf16.msra.mxu0 %v602
  %7665 = vmatprep.subr.bf16.mxu0 0
  %7666 = vmatpush1.bf16.msra.mxu0 %v603
  %7667 = vmatprep.subr.bf16.mxu0 0
  %7668 = vmatpush1.bf16.msra.mxu0 %v604
  %7669 = vmatprep.subr.bf16.mxu0 0
  %7670 = vmatpush1.bf16.msra.mxu0 %v605
  %7671 = vmatprep.subr.bf16.mxu0 0
  %7672 = vmatpush1.bf16.msra.mxu0 %v606
  %7673 = vmatprep.subr.bf16.mxu0 0
  %7674 = vmatpush1.bf16.msra.mxu0 %v607
  %7675 = vmatprep.subr.bf16.mxu0 0
  %7676 = vmatpush1.bf16.msra.mxu0 %v608
  %7677 = vmatprep.subr.bf16.mxu0 0
  %7678 = vmatpush1.bf16.msra.mxu0 %v609
  %7679 = vmatprep.subr.bf16.mxu0 0
  %7680 = vmatpush1.bf16.msra.mxu0 %v788
  %7681 = vmatprep.subr.bf16.mxu0 0
  %7682 = vmatpush1.bf16.msra.mxu0 0
  %7683 = vmatprep.subr.bf16.mxu0 0
  %7684 = vmatpush1.bf16.msra.mxu0 0
  %7685 = vmatprep.subr.bf16.mxu0 0
  %7686 = vmatpush1.bf16.msra.mxu0 0
  %7687 = vmatprep.subr.bf16.mxu0 0
  %7688 = vmatpush1.bf16.msra.mxu0 0
  %7689 = vmatprep.subr.bf16.mxu0 0
  %7690 = vmatpush1.bf16.msra.mxu0 0
  %7691 = vmatprep.subr.bf16.mxu0 0
  %7692 = vmatpush1.bf16.msra.mxu0 0
  %7693 = vmatprep.subr.bf16.mxu0 0
  %7694 = vmatpush1.bf16.msra.mxu0 0
  %7695 = vmatprep.mubr.bf16.mxu0 %v7555
  %7696 = vmatmul.mubr.bf16.gmra.mrb[0].mxu0 %v7507
  %v7697 = vpop.f32.mrb[0].mxu0
  %v7698 = vadd.f32 %v7610, %v7697
  %v7699 = vpop.f32.mrb[0].mxu0
  %v7700 = vpop.f32.mrb[0].mxu0
  %v7701 = vadd.f32 %v7613, %v7700
  %v7702 = vpop.f32.mrb[0].mxu0
  %7703 = vmatprep.mubr.bf16.mxu0 %v7558
  %7704 = vmatmul.mubr.bf16.gmra.mrb[0].mxu0 %v7511
  %v7705 = vpop.f32.mrb[0].mxu0
  %v7706 = vadd.f32 %v7618, %v7705
  %v7707 = vpop.f32.mrb[0].mxu0
  %v7708 = vpop.f32.mrb[0].mxu0
  %v7709 = vadd.f32 %v7621, %v7708
  %v7710 = vpop.f32.mrb[0].mxu0
  %7711 = vmatprep.mubr.bf16.mxu0 %v7561
  %7712 = vmatmul.mubr.bf16.gmra.mrb[0].mxu0 %v7515
  %v7713 = vpop.f32.mrb[0].mxu0
  %v7714 = vadd.f32 %v7626, %v7713
  %v7715 = vpop.f32.mrb[0].mxu0
  %v7716 = vpop.f32.mrb[0].mxu0
  %v7717 = vadd.f32 %v7629, %v7716
  %v7718 = vpop.f32.mrb[0].mxu0
  %7719 = vmatprep.mubr.bf16.mxu0 %v7564
  %7720 = vmatmul.mubr.bf16.gmra.mrb[0].mxu0 %v7519
  %v7721 = vpop.f32.mrb[0].mxu0
  %v7722 = vadd.f32 %v7634, %v7721
  %v7723 = vpop.f32.mrb[0].mxu0
  %v7724 = vpop.f32.mrb[0].mxu0
  %v7725 = vadd.f32 %v7637, %v7724
  %v7726 = vpop.f32.mrb[0].mxu0
  %7727 = vmatprep.mubr.bf16.mxu0 %v7567
  %7728 = vmatmul.mubr.bf16.gmra.mrb[0].mxu0 %v7523
  %v7729 = vpop.f32.mrb[0].mxu0
  %v7730 = vadd.f32 %v7642, %v7729
  %v7731 = vpop.f32.mrb[0].mxu0
  %v7732 = vpop.f32.mrb[0].mxu0
  %v7733 = vadd.f32 %v7645, %v7732
  %v7734 = vpop.f32.mrb[0].mxu0
  %7735 = vmatprep.mubr.bf16.mxu0 %v7570
  %7736 = vmatmul.mubr.bf16.gmra.mrb[0].mxu0 %v7527
  %v7737 = vpop.f32.mrb[0].mxu0
  %v7738 = vadd.f32 %v7650, %v7737
  %v7739 = vpop.f32.mrb[0].mxu0
  %v7740 = vpop.f32.mrb[0].mxu0
  %v7741 = vadd.f32 %v7653, %v7740
  %v7742 = vpop.f32.mrb[0].mxu0
  %7743 = vmatprep.mubr.bf16.mxu0 %v7573
  %7744 = vmatmul.mubr.bf16.gmra.mrb[0].mxu0 %v7531
  %v7745 = vpop.f32.mrb[0].mxu0
  %v7746 = vadd.f32 %v7658, %v7745
  %v7747 = vpop.f32.mrb[0].mxu0
  %v7748 = vpop.f32.mrb[0].mxu0
  %v7749 = vpop.f32.mrb[0].mxu0
  %7750 = vdwg.mxu0
  %v7751 = vpack.c.bf16 %v7701, %v7698
  %v7752 = vpack.c.bf16 %v7709, %v7706
  %v7753 = vpack.c.bf16 %v7717, %v7714
  %v7754 = vpack.c.bf16 %v7725, %v7722
  %v7755 = vpack.c.bf16 %v7733, %v7730
  %v7756 = vpack.c.bf16 %v7741, %v7738
  %v7757 = vpack.c.bf16 %v7746, %v7746
  %s7758 = scalar_lea.vmem %s4, 832
  %v7759 = vld [vmem:[%s7758] sm:$0xf]
  %v7760 = vld [vmem:[%s7758 + $0x4] sm:$0xf]
  %v7761 = vld [vmem:[%s7758 + $0x8] sm:$0xf]
  %v7762 = vld [vmem:[%s7758 + $0xc] sm:$0xf]
  %v7763 = vld [vmem:[%s7758 + $0x10] sm:$0xf]
  %v7764 = vld [vmem:[%s7758 + $0x14] sm:$0xf]
  %v7765 = vld [vmem:[%s7758 + $0x18] sm:$0xf]
  %v7766 = vld [vmem:[%s7758 + $0x1c] sm:$0xf]
  %v7767 = vld [vmem:[%s7758 + $0x20] sm:$0xf]
  %v7768 = vld [vmem:[%s7758 + $0x24] sm:$0xf]
  %v7769 = vld [vmem:[%s7758 + $0x28] sm:$0xf]
  %v7770 = vld [vmem:[%s7758 + $0x2c] sm:$0xf]
  %v7771 = vld [vmem:[%s7758 + $0x30] sm:$0xf]
  %v7772 = vld [vmem:[%s7758 + $0x34] sm:$0xf]
  %v7773 = vld [vmem:[%s7758 + $0x38] sm:$0xf]
  %v7774 = vld [vmem:[%s7758 + $0x3c] sm:$0xf]
  %v7791 = vunpack.c.l.b16 %v7759
  %v7792 = vunpack.c.l.b16 %v7760
  %v7793 = vunpack.c.l.b16 %v7761
  %v7794 = vunpack.c.l.b16 %v7762
  %v7795 = vunpack.c.l.b16 %v7763
  %v7796 = vunpack.c.l.b16 %v7764
  %v7797 = vunpack.c.l.b16 %v7765
  %v7798 = vunpack.c.l.b16 %v7766
  %v7799 = vunpack.c.l.b16 %v7767
  %v7800 = vunpack.c.l.b16 %v7768
  %v7801 = vunpack.c.l.b16 %v7769
  %v7802 = vunpack.c.l.b16 %v7770
  %v7803 = vunpack.c.l.b16 %v7771
  %v7804 = vunpack.c.l.b16 %v7772
  %v7805 = vunpack.c.l.b16 %v7773
  %v7806 = vunpack.c.l.b16 %v7774
  %v7807 = vpack.c.b16 %v7792, %v7791
  %v7808 = vpack.c.b16 %v7794, %v7793
  %v7809 = vpack.c.b16 %v7796, %v7795
  %v7810 = vpack.c.b16 %v7798, %v7797
  %v7811 = vpack.c.b16 %v7800, %v7799
  %v7812 = vpack.c.b16 %v7802, %v7801
  %v7813 = vpack.c.b16 %v7804, %v7803
  %v7814 = vpack.c.b16 %v7806, %v7805
  %7823 = vmatprep.subr.bf16.mxu0 0
  %7824 = vmatpush1.bf16.msra.mxu0 %v7807
  %7825 = vmatprep.subr.bf16.mxu0 0
  %7826 = vmatpush1.bf16.msra.mxu0 %v7808
  %7827 = vmatprep.subr.bf16.mxu0 0
  %7828 = vmatpush1.bf16.msra.mxu0 %v7809
  %7829 = vmatprep.subr.bf16.mxu0 0
  %7830 = vmatpush1.bf16.msra.mxu0 %v7810
  %7831 = vmatprep.subr.bf16.mxu0 0
  %7832 = vmatpush1.bf16.msra.mxu0 %v7811
  %7833 = vmatprep.subr.bf16.mxu0 0
  %7834 = vmatpush1.bf16.msra.mxu0 %v7812
  %7835 = vmatprep.subr.bf16.mxu0 0
  %7836 = vmatpush1.bf16.msra.mxu0 %v7813
  %7837 = vmatprep.subr.bf16.mxu0 0
  %7838 = vmatpush1.bf16.msra.mxu0 %v7814
  %7839 = vmatprep.subr.bf16.mxu0 0
  %7840 = vmatpush1.bf16.msra.mxu0 0
  %7841 = vmatprep.subr.bf16.mxu0 0
  %7842 = vmatpush1.bf16.msra.mxu0 0
  %7843 = vmatprep.subr.bf16.mxu0 0
  %7844 = vmatpush1.bf16.msra.mxu0 0
  %7845 = vmatprep.subr.bf16.mxu0 0
  %7846 = vmatpush1.bf16.msra.mxu0 0
  %7847 = vmatprep.subr.bf16.mxu0 0
  %7848 = vmatpush1.bf16.msra.mxu0 0
  %7849 = vmatprep.subr.bf16.mxu0 0
  %7850 = vmatpush1.bf16.msra.mxu0 0
  %7851 = vmatprep.subr.bf16.mxu0 0
  %7852 = vmatpush1.bf16.msra.mxu0 0
  %7853 = vmatprep.subr.bf16.mxu0 0
  %7854 = vmatpush1.bf16.msra.mxu0 0
  %7855 = vmatprep.mubr.bf16.mxu0 0
  %7856 = vmatmul.mubr.bf16.gmra.mrb[0].mxu0 %v7751
  %v7857 = vpop.f32.mrb[0].mxu0
  %v7858 = vadd.f32 0.0, %v7857
  %v7859 = vpop.f32.mrb[0].mxu0
  %v7860 = vpop.f32.mrb[0].mxu0
  %v7861 = vadd.f32 0.0, %v7860
  %v7862 = vpop.f32.mrb[0].mxu0
  %7863 = vmatprep.mubr.bf16.mxu0 0
  %7864 = vmatmul.mubr.bf16.gmra.mrb[0].mxu0 %v7752
  %v7865 = vpop.f32.mrb[0].mxu0
  %v7866 = vadd.f32 0.0, %v7865
  %v7867 = vpop.f32.mrb[0].mxu0
  %v7868 = vpop.f32.mrb[0].mxu0
  %v7869 = vadd.f32 0.0, %v7868
  %v7870 = vpop.f32.mrb[0].mxu0
  %7871 = vmatprep.mubr.bf16.mxu0 0
  %7872 = vmatmul.mubr.bf16.gmra.mrb[0].mxu0 %v7753
  %v7873 = vpop.f32.mrb[0].mxu0
  %v7874 = vadd.f32 0.0, %v7873
  %v7875 = vpop.f32.mrb[0].mxu0
  %v7876 = vpop.f32.mrb[0].mxu0
  %v7877 = vadd.f32 0.0, %v7876
  %v7878 = vpop.f32.mrb[0].mxu0
  %7879 = vmatprep.mubr.bf16.mxu0 0
  %7880 = vmatmul.mubr.bf16.gmra.mrb[0].mxu0 %v7754
  %v7881 = vpop.f32.mrb[0].mxu0
  %v7882 = vadd.f32 0.0, %v7881
  %v7883 = vpop.f32.mrb[0].mxu0
  %v7884 = vpop.f32.mrb[0].mxu0
  %v7885 = vadd.f32 0.0, %v7884
  %v7886 = vpop.f32.mrb[0].mxu0
  %7887 = vmatprep.mubr.bf16.mxu0 0
  %7888 = vmatmul.mubr.bf16.gmra.mrb[0].mxu0 %v7755
  %v7889 = vpop.f32.mrb[0].mxu0
  %v7890 = vadd.f32 0.0, %v7889
  %v7891 = vpop.f32.mrb[0].mxu0
  %v7892 = vpop.f32.mrb[0].mxu0
  %v7893 = vadd.f32 0.0, %v7892
  %v7894 = vpop.f32.mrb[0].mxu0
  %7895 = vmatprep.mubr.bf16.mxu0 0
  %7896 = vmatmul.mubr.bf16.gmra.mrb[0].mxu0 %v7756
  %v7897 = vpop.f32.mrb[0].mxu0
  %v7898 = vadd.f32 0.0, %v7897
  %v7899 = vpop.f32.mrb[0].mxu0
  %v7900 = vpop.f32.mrb[0].mxu0
  %v7901 = vadd.f32 0.0, %v7900
  %v7902 = vpop.f32.mrb[0].mxu0
  %7903 = vmatprep.mubr.bf16.mxu0 0
  %7904 = vmatmul.mubr.bf16.gmra.mrb[0].mxu0 %v7757
  %v7905 = vpop.f32.mrb[0].mxu0
  %v7906 = vadd.f32 0.0, %v7905
  %v7907 = vpop.f32.mrb[0].mxu0
  %v7908 = vpop.f32.mrb[0].mxu0
  %v7909 = vpop.f32.mrb[0].mxu0
  %7910 = vdwg.mxu0
  %v7911 = vadd.f32 %v7387, %v7858
  %v7912 = vadd.f32 %v7388, %v7861
  %v7913 = vadd.f32 %v7389, %v7866
  %v7914 = vadd.f32 %v7390, %v7869
  %v7915 = vadd.f32 %v7391, %v7874
  %v7916 = vadd.f32 %v7392, %v7877
  %v7917 = vadd.f32 %v7393, %v7882
  %v7918 = vadd.f32 %v7394, %v7885
  %v7919 = vadd.f32 %v7395, %v7890
  %v7920 = vadd.f32 %v7396, %v7893
  %v7921 = vadd.f32 %v7397, %v7898
  %v7922 = vadd.f32 %v7398, %v7901
  %v7923 = vadd.f32 %v7399, %v7906
  %s7924 = scalar_lea.vmem %s3, 2912
  %v7925 = vld [vmem:[%s7924] sm:$0xff]
  %v7926 = vld [vmem:[%s7924 + $0x8] sm:$0xff]
  %v7927 = vld [vmem:[%s7924 + $0x10] sm:$0xff]
  %v7928 = vld [vmem:[%s7924 + $0x18] sm:$0xff]
  %v7929 = vld [vmem:[%s7924 + $0x20] sm:$0xff]
  %v7930 = vld [vmem:[%s7924 + $0x28] sm:$0xff]
  %v7931 = vld [vmem:[%s7924 + $0x30] sm:$0xff]
  %v7932 = vld [vmem:[%s7924 + $0x38] sm:$0xff]
  %v7933 = vld [vmem:[%s7924 + $0x40] sm:$0xff]
  %v7934 = vld [vmem:[%s7924 + $0x48] sm:$0xff]
  %v7935 = vld [vmem:[%s7924 + $0x50] sm:$0xff]
  %v7936 = vld [vmem:[%s7924 + $0x58] sm:$0xff]
  %v7937 = vld [vmem:[%s7924 + $0x60] sm:$0xff]
  %v7938 = vld [vmem:[%s7924 + $0x68] sm:$0xff]
  %v7939 = vld [vmem:[%s7924 + $0x70] sm:$0xff]
  %v7940 = vld [vmem:[%s7924 + $0x78] sm:$0xff]
  %v7941 = vld [vmem:[%s7924 + $0x80] sm:$0xff]
  %v7942 = vld [vmem:[%s7924 + $0x88] sm:$0xff]
  %v7943 = vld [vmem:[%s7924 + $0x90] sm:$0xff]
  %v7944 = vld [vmem:[%s7924 + $0x98] sm:$0xff]
  %v7945 = vld [vmem:[%s7924 + $0xa0] sm:$0xff]
  %v7946 = vld [vmem:[%s7924 + $0xa8] sm:$0xff]
  %v7947 = vld [vmem:[%s7924 + $0xb0] sm:$0xff]
  %v7948 = vld [vmem:[%s7924 + $0xb8] sm:$0xff]
  %v7949 = vld [vmem:[%s7924 + $0xc0] sm:$0xff]
  %v7950 = vld [vmem:[%s7924 + $0xc8] sm:$0xff]
  %v7977 = vunpack.c.l.b16 %v7925
  %v7978 = vunpack.c.h.b16 %v7925
  %v7979 = vunpack.c.l.b16 %v7926
  %v7980 = vunpack.c.h.b16 %v7926
  %v7981 = vunpack.c.l.b16 %v7927
  %v7982 = vunpack.c.h.b16 %v7927
  %v7983 = vunpack.c.l.b16 %v7928
  %v7984 = vunpack.c.h.b16 %v7928
  %v7985 = vunpack.c.l.b16 %v7929
  %v7986 = vunpack.c.h.b16 %v7929
  %v7987 = vunpack.c.l.b16 %v7930
  %v7988 = vunpack.c.h.b16 %v7930
  %v7989 = vunpack.c.l.b16 %v7931
  %v7990 = vunpack.c.h.b16 %v7931
  %v7991 = vunpack.c.l.b16 %v7932
  %v7992 = vunpack.c.h.b16 %v7932
  %v7993 = vunpack.c.l.b16 %v7933
  %v7994 = vunpack.c.h.b16 %v7933
  %v7995 = vunpack.c.l.b16 %v7934
  %v7996 = vunpack.c.h.b16 %v7934
  %v7997 = vunpack.c.l.b16 %v7935
  %v7998 = vunpack.c.h.b16 %v7935
  %v7999 = vunpack.c.l.b16 %v7936
  %v8000 = vunpack.c.h.b16 %v7936
  %v8001 = vunpack.c.l.b16 %v7937
  %v8002 = vunpack.c.h.b16 %v7937
  %v8003 = vunpack.c.l.b16 %v7938
  %v8004 = vunpack.c.h.b16 %v7938
  %v8005 = vunpack.c.l.b16 %v7939
  %v8006 = vunpack.c.h.b16 %v7939
  %v8007 = vunpack.c.l.b16 %v7940
  %v8008 = vunpack.c.h.b16 %v7940
  %v8009 = vunpack.c.l.b16 %v7941
  %v8010 = vunpack.c.h.b16 %v7941
  %v8011 = vunpack.c.l.b16 %v7942
  %v8012 = vunpack.c.h.b16 %v7942
  %v8013 = vunpack.c.l.b16 %v7943
  %v8014 = vunpack.c.h.b16 %v7943
  %v8015 = vunpack.c.l.b16 %v7944
  %v8016 = vunpack.c.h.b16 %v7944
  %v8017 = vunpack.c.l.b16 %v7945
  %v8018 = vunpack.c.h.b16 %v7945
  %v8019 = vunpack.c.l.b16 %v7946
  %v8020 = vunpack.c.h.b16 %v7946
  %v8021 = vunpack.c.l.b16 %v7947
  %v8022 = vunpack.c.h.b16 %v7947
  %v8023 = vunpack.c.l.b16 %v7948
  %v8024 = vunpack.c.h.b16 %v7948
  %v8025 = vunpack.c.l.b16 %v7949
  %v8026 = vunpack.c.h.b16 %v7949
  %v8027 = vunpack.c.l.b16 %v7950
  %v8028 = vunpack.c.h.b16 %v7950
  %v8029 = vpack.c.b16 %v7981, %v7977
  %v8030 = vpack.c.b16 %v7982, %v7978
  %v8031 = vpack.c.b16 %v7983, %v7979
  %v8032 = vpack.c.b16 %v7984, %v7980
  %v8033 = vpack.c.b16 %v7989, %v7985
  %v8034 = vpack.c.b16 %v7990, %v7986
  %v8035 = vpack.c.b16 %v7991, %v7987
  %v8036 = vpack.c.b16 %v7992, %v7988
  %v8037 = vpack.c.b16 %v7997, %v7993
  %v8038 = vpack.c.b16 %v7998, %v7994
  %v8039 = vpack.c.b16 %v7999, %v7995
  %v8040 = vpack.c.b16 %v8000, %v7996
  %v8041 = vpack.c.b16 %v8005, %v8001
  %v8042 = vpack.c.b16 %v8006, %v8002
  %v8043 = vpack.c.b16 %v8007, %v8003
  %v8044 = vpack.c.b16 %v8008, %v8004
  %v8045 = vpack.c.b16 %v8013, %v8009
  %v8046 = vpack.c.b16 %v8014, %v8010
  %v8047 = vpack.c.b16 %v8015, %v8011
  %v8048 = vpack.c.b16 %v8016, %v8012
  %v8049 = vpack.c.b16 %v8021, %v8017
  %v8050 = vpack.c.b16 %v8022, %v8018
  %v8051 = vpack.c.b16 %v8023, %v8019
  %v8052 = vpack.c.b16 %v8024, %v8020
  %v8053 = vpack.c.b16 %v8025, %v8025
  %v8054 = vpack.c.b16 %v8026, %v8026
  %v8055 = vpack.c.b16 %v8027, %v8027
  %v8056 = vpack.c.b16 %v8028, %v8028
  %v8079 = vsel %vm764, %v8032, 0
  %v8082 = vsel %vm764, %v8036, 0
  %v8085 = vsel %vm764, %v8040, 0
  %v8088 = vsel %vm764, %v8044, 0
  %v8091 = vsel %vm764, %v8048, 0
  %v8094 = vsel %vm764, %v8052, 0
  %v8097 = vsel %vm764, %v8056, 0
  %8099 = vmatprep.subr.bf16.mxu0 0
  %8100 = vmatpush1.bf16.msra.mxu0 %v586
  %8101 = vmatprep.subr.bf16.mxu0 0
  %8102 = vmatpush1.bf16.msra.mxu0 %v587
  %8103 = vmatprep.subr.bf16.mxu0 0
  %8104 = vmatpush1.bf16.msra.mxu0 %v588
  %8105 = vmatprep.subr.bf16.mxu0 0
  %8106 = vmatpush1.bf16.msra.mxu0 %v589
  %8107 = vmatprep.subr.bf16.mxu0 0
  %8108 = vmatpush1.bf16.msra.mxu0 %v590
  %8109 = vmatprep.subr.bf16.mxu0 0
  %8110 = vmatpush1.bf16.msra.mxu0 %v591
  %8111 = vmatprep.subr.bf16.mxu0 0
  %8112 = vmatpush1.bf16.msra.mxu0 %v592
  %8113 = vmatprep.subr.bf16.mxu0 0
  %8114 = vmatpush1.bf16.msra.mxu0 %v593
  %8115 = vmatprep.subr.bf16.mxu0 0
  %8116 = vmatpush1.bf16.msra.mxu0 %v594
  %8117 = vmatprep.subr.bf16.mxu0 0
  %8118 = vmatpush1.bf16.msra.mxu0 %v595
  %8119 = vmatprep.subr.bf16.mxu0 0
  %8120 = vmatpush1.bf16.msra.mxu0 %v596
  %8121 = vmatprep.subr.bf16.mxu0 0
  %8122 = vmatpush1.bf16.msra.mxu0 %v597
  %8123 = vmatprep.subr.bf16.mxu0 0
  %8124 = vmatpush1.bf16.msra.mxu0 %v598
  %8125 = vmatprep.subr.bf16.mxu0 0
  %8126 = vmatpush1.bf16.msra.mxu0 %v599
  %8127 = vmatprep.subr.bf16.mxu0 0
  %8128 = vmatpush1.bf16.msra.mxu0 %v600
  %8129 = vmatprep.subr.bf16.mxu0 0
  %8130 = vmatpush1.bf16.msra.mxu0 %v601
  %8131 = vmatprep.mubr.bf16.mxu0 %v8030
  %8132 = vmatmul.mubr.bf16.gmra.mrb[0].mxu0 %v8029
  %v8133 = vpop.f32.mrb[0].mxu0
  %v8134 = vadd.f32 0.0, %v8133
  %v8135 = vpop.f32.mrb[0].mxu0
  %v8136 = vpop.f32.mrb[0].mxu0
  %v8137 = vadd.f32 0.0, %v8136
  %v8138 = vpop.f32.mrb[0].mxu0
  %8139 = vmatprep.mubr.bf16.mxu0 %v8034
  %8140 = vmatmul.mubr.bf16.gmra.mrb[0].mxu0 %v8033
  %v8141 = vpop.f32.mrb[0].mxu0
  %v8142 = vadd.f32 0.0, %v8141
  %v8143 = vpop.f32.mrb[0].mxu0
  %v8144 = vpop.f32.mrb[0].mxu0
  %v8145 = vadd.f32 0.0, %v8144
  %v8146 = vpop.f32.mrb[0].mxu0
  %8147 = vmatprep.mubr.bf16.mxu0 %v8038
  %8148 = vmatmul.mubr.bf16.gmra.mrb[0].mxu0 %v8037
  %v8149 = vpop.f32.mrb[0].mxu0
  %v8150 = vadd.f32 0.0, %v8149
  %v8151 = vpop.f32.mrb[0].mxu0
  %v8152 = vpop.f32.mrb[0].mxu0
  %v8153 = vadd.f32 0.0, %v8152
  %v8154 = vpop.f32.mrb[0].mxu0
  %8155 = vmatprep.mubr.bf16.mxu0 %v8042
  %8156 = vmatmul.mubr.bf16.gmra.mrb[0].mxu0 %v8041
  %v8157 = vpop.f32.mrb[0].mxu0
  %v8158 = vadd.f32 0.0, %v8157
  %v8159 = vpop.f32.mrb[0].mxu0
  %v8160 = vpop.f32.mrb[0].mxu0
  %v8161 = vadd.f32 0.0, %v8160
  %v8162 = vpop.f32.mrb[0].mxu0
  %8163 = vmatprep.mubr.bf16.mxu0 %v8046
  %8164 = vmatmul.mubr.bf16.gmra.mrb[0].mxu0 %v8045
  %v8165 = vpop.f32.mrb[0].mxu0
  %v8166 = vadd.f32 0.0, %v8165
  %v8167 = vpop.f32.mrb[0].mxu0
  %v8168 = vpop.f32.mrb[0].mxu0
  %v8169 = vadd.f32 0.0, %v8168
  %v8170 = vpop.f32.mrb[0].mxu0
  %8171 = vmatprep.mubr.bf16.mxu0 %v8050
  %8172 = vmatmul.mubr.bf16.gmra.mrb[0].mxu0 %v8049
  %v8173 = vpop.f32.mrb[0].mxu0
  %v8174 = vadd.f32 0.0, %v8173
  %v8175 = vpop.f32.mrb[0].mxu0
  %v8176 = vpop.f32.mrb[0].mxu0
  %v8177 = vadd.f32 0.0, %v8176
  %v8178 = vpop.f32.mrb[0].mxu0
  %8179 = vmatprep.mubr.bf16.mxu0 %v8054
  %8180 = vmatmul.mubr.bf16.gmra.mrb[0].mxu0 %v8053
  %v8181 = vpop.f32.mrb[0].mxu0
  %v8182 = vadd.f32 0.0, %v8181
  %v8183 = vpop.f32.mrb[0].mxu0
  %v8184 = vpop.f32.mrb[0].mxu0
  %v8185 = vpop.f32.mrb[0].mxu0
  %8186 = vdwg.mxu0
  %8187 = vmatprep.subr.bf16.mxu0 0
  %8188 = vmatpush1.bf16.msra.mxu0 %v602
  %8189 = vmatprep.subr.bf16.mxu0 0
  %8190 = vmatpush1.bf16.msra.mxu0 %v603
  %8191 = vmatprep.subr.bf16.mxu0 0
  %8192 = vmatpush1.bf16.msra.mxu0 %v604
  %8193 = vmatprep.subr.bf16.mxu0 0
  %8194 = vmatpush1.bf16.msra.mxu0 %v605
  %8195 = vmatprep.subr.bf16.mxu0 0
  %8196 = vmatpush1.bf16.msra.mxu0 %v606
  %8197 = vmatprep.subr.bf16.mxu0 0
  %8198 = vmatpush1.bf16.msra.mxu0 %v607
  %8199 = vmatprep.subr.bf16.mxu0 0
  %8200 = vmatpush1.bf16.msra.mxu0 %v608
  %8201 = vmatprep.subr.bf16.mxu0 0
  %8202 = vmatpush1.bf16.msra.mxu0 %v609
  %8203 = vmatprep.subr.bf16.mxu0 0
  %8204 = vmatpush1.bf16.msra.mxu0 %v788
  %8205 = vmatprep.subr.bf16.mxu0 0
  %8206 = vmatpush1.bf16.msra.mxu0 0
  %8207 = vmatprep.subr.bf16.mxu0 0
  %8208 = vmatpush1.bf16.msra.mxu0 0
  %8209 = vmatprep.subr.bf16.mxu0 0
  %8210 = vmatpush1.bf16.msra.mxu0 0
  %8211 = vmatprep.subr.bf16.mxu0 0
  %8212 = vmatpush1.bf16.msra.mxu0 0
  %8213 = vmatprep.subr.bf16.mxu0 0
  %8214 = vmatpush1.bf16.msra.mxu0 0
  %8215 = vmatprep.subr.bf16.mxu0 0
  %8216 = vmatpush1.bf16.msra.mxu0 0
  %8217 = vmatprep.subr.bf16.mxu0 0
  %8218 = vmatpush1.bf16.msra.mxu0 0
  %8219 = vmatprep.mubr.bf16.mxu0 %v8079
  %8220 = vmatmul.mubr.bf16.gmra.mrb[0].mxu0 %v8031
  %v8221 = vpop.f32.mrb[0].mxu0
  %v8222 = vadd.f32 %v8134, %v8221
  %v8223 = vpop.f32.mrb[0].mxu0
  %v8224 = vpop.f32.mrb[0].mxu0
  %v8225 = vadd.f32 %v8137, %v8224
  %v8226 = vpop.f32.mrb[0].mxu0
  %8227 = vmatprep.mubr.bf16.mxu0 %v8082
  %8228 = vmatmul.mubr.bf16.gmra.mrb[0].mxu0 %v8035
  %v8229 = vpop.f32.mrb[0].mxu0
  %v8230 = vadd.f32 %v8142, %v8229
  %v8231 = vpop.f32.mrb[0].mxu0
  %v8232 = vpop.f32.mrb[0].mxu0
  %v8233 = vadd.f32 %v8145, %v8232
  %v8234 = vpop.f32.mrb[0].mxu0
  %8235 = vmatprep.mubr.bf16.mxu0 %v8085
  %8236 = vmatmul.mubr.bf16.gmra.mrb[0].mxu0 %v8039
  %v8237 = vpop.f32.mrb[0].mxu0
  %v8238 = vadd.f32 %v8150, %v8237
  %v8239 = vpop.f32.mrb[0].mxu0
  %v8240 = vpop.f32.mrb[0].mxu0
  %v8241 = vadd.f32 %v8153, %v8240
  %v8242 = vpop.f32.mrb[0].mxu0
  %8243 = vmatprep.mubr.bf16.mxu0 %v8088
  %8244 = vmatmul.mubr.bf16.gmra.mrb[0].mxu0 %v8043
  %v8245 = vpop.f32.mrb[0].mxu0
  %v8246 = vadd.f32 %v8158, %v8245
  %v8247 = vpop.f32.mrb[0].mxu0
  %v8248 = vpop.f32.mrb[0].mxu0
  %v8249 = vadd.f32 %v8161, %v8248
  %v8250 = vpop.f32.mrb[0].mxu0
  %8251 = vmatprep.mubr.bf16.mxu0 %v8091
  %8252 = vmatmul.mubr.bf16.gmra.mrb[0].mxu0 %v8047
  %v8253 = vpop.f32.mrb[0].mxu0
  %v8254 = vadd.f32 %v8166, %v8253
  %v8255 = vpop.f32.mrb[0].mxu0
  %v8256 = vpop.f32.mrb[0].mxu0
  %v8257 = vadd.f32 %v8169, %v8256
  %v8258 = vpop.f32.mrb[0].mxu0
  %8259 = vmatprep.mubr.bf16.mxu0 %v8094
  %8260 = vmatmul.mubr.bf16.gmra.mrb[0].mxu0 %v8051
  %v8261 = vpop.f32.mrb[0].mxu0
  %v8262 = vadd.f32 %v8174, %v8261
  %v8263 = vpop.f32.mrb[0].mxu0
  %v8264 = vpop.f32.mrb[0].mxu0
  %v8265 = vadd.f32 %v8177, %v8264
  %v8266 = vpop.f32.mrb[0].mxu0
  %8267 = vmatprep.mubr.bf16.mxu0 %v8097
  %8268 = vmatmul.mubr.bf16.gmra.mrb[0].mxu0 %v8055
  %v8269 = vpop.f32.mrb[0].mxu0
  %v8270 = vadd.f32 %v8182, %v8269
  %v8271 = vpop.f32.mrb[0].mxu0
  %v8272 = vpop.f32.mrb[0].mxu0
  %v8273 = vpop.f32.mrb[0].mxu0
  %8274 = vdwg.mxu0
  %v8275 = vpack.c.bf16 %v8225, %v8222
  %v8276 = vpack.c.bf16 %v8233, %v8230
  %v8277 = vpack.c.bf16 %v8241, %v8238
  %v8278 = vpack.c.bf16 %v8249, %v8246
  %v8279 = vpack.c.bf16 %v8257, %v8254
  %v8280 = vpack.c.bf16 %v8265, %v8262
  %v8281 = vpack.c.bf16 %v8270, %v8270
  %s8282 = scalar_lea.vmem %s4, 896
  %v8283 = vld [vmem:[%s8282] sm:$0xf]
  %v8284 = vld [vmem:[%s8282 + $0x4] sm:$0xf]
  %v8285 = vld [vmem:[%s8282 + $0x8] sm:$0xf]
  %v8286 = vld [vmem:[%s8282 + $0xc] sm:$0xf]
  %v8287 = vld [vmem:[%s8282 + $0x10] sm:$0xf]
  %v8288 = vld [vmem:[%s8282 + $0x14] sm:$0xf]
  %v8289 = vld [vmem:[%s8282 + $0x18] sm:$0xf]
  %v8290 = vld [vmem:[%s8282 + $0x1c] sm:$0xf]
  %v8291 = vld [vmem:[%s8282 + $0x20] sm:$0xf]
  %v8292 = vld [vmem:[%s8282 + $0x24] sm:$0xf]
  %v8293 = vld [vmem:[%s8282 + $0x28] sm:$0xf]
  %v8294 = vld [vmem:[%s8282 + $0x2c] sm:$0xf]
  %v8295 = vld [vmem:[%s8282 + $0x30] sm:$0xf]
  %v8296 = vld [vmem:[%s8282 + $0x34] sm:$0xf]
  %v8297 = vld [vmem:[%s8282 + $0x38] sm:$0xf]
  %v8298 = vld [vmem:[%s8282 + $0x3c] sm:$0xf]
  %v8315 = vunpack.c.l.b16 %v8283
  %v8316 = vunpack.c.l.b16 %v8284
  %v8317 = vunpack.c.l.b16 %v8285
  %v8318 = vunpack.c.l.b16 %v8286
  %v8319 = vunpack.c.l.b16 %v8287
  %v8320 = vunpack.c.l.b16 %v8288
  %v8321 = vunpack.c.l.b16 %v8289
  %v8322 = vunpack.c.l.b16 %v8290
  %v8323 = vunpack.c.l.b16 %v8291
  %v8324 = vunpack.c.l.b16 %v8292
  %v8325 = vunpack.c.l.b16 %v8293
  %v8326 = vunpack.c.l.b16 %v8294
  %v8327 = vunpack.c.l.b16 %v8295
  %v8328 = vunpack.c.l.b16 %v8296
  %v8329 = vunpack.c.l.b16 %v8297
  %v8330 = vunpack.c.l.b16 %v8298
  %v8331 = vpack.c.b16 %v8316, %v8315
  %v8332 = vpack.c.b16 %v8318, %v8317
  %v8333 = vpack.c.b16 %v8320, %v8319
  %v8334 = vpack.c.b16 %v8322, %v8321
  %v8335 = vpack.c.b16 %v8324, %v8323
  %v8336 = vpack.c.b16 %v8326, %v8325
  %v8337 = vpack.c.b16 %v8328, %v8327
  %v8338 = vpack.c.b16 %v8330, %v8329
  %8347 = vmatprep.subr.bf16.mxu0 0
  %8348 = vmatpush1.bf16.msra.mxu0 %v8331
  %8349 = vmatprep.subr.bf16.mxu0 0
  %8350 = vmatpush1.bf16.msra.mxu0 %v8332
  %8351 = vmatprep.subr.bf16.mxu0 0
  %8352 = vmatpush1.bf16.msra.mxu0 %v8333
  %8353 = vmatprep.subr.bf16.mxu0 0
  %8354 = vmatpush1.bf16.msra.mxu0 %v8334
  %8355 = vmatprep.subr.bf16.mxu0 0
  %8356 = vmatpush1.bf16.msra.mxu0 %v8335
  %8357 = vmatprep.subr.bf16.mxu0 0
  %8358 = vmatpush1.bf16.msra.mxu0 %v8336
  %8359 = vmatprep.subr.bf16.mxu0 0
  %8360 = vmatpush1.bf16.msra.mxu0 %v8337
  %8361 = vmatprep.subr.bf16.mxu0 0
  %8362 = vmatpush1.bf16.msra.mxu0 %v8338
  %8363 = vmatprep.subr.bf16.mxu0 0
  %8364 = vmatpush1.bf16.msra.mxu0 0
  %8365 = vmatprep.subr.bf16.mxu0 0
  %8366 = vmatpush1.bf16.msra.mxu0 0
  %8367 = vmatprep.subr.bf16.mxu0 0
  %8368 = vmatpush1.bf16.msra.mxu0 0
  %8369 = vmatprep.subr.bf16.mxu0 0
  %8370 = vmatpush1.bf16.msra.mxu0 0
  %8371 = vmatprep.subr.bf16.mxu0 0
  %8372 = vmatpush1.bf16.msra.mxu0 0
  %8373 = vmatprep.subr.bf16.mxu0 0
  %8374 = vmatpush1.bf16.msra.mxu0 0
  %8375 = vmatprep.subr.bf16.mxu0 0
  %8376 = vmatpush1.bf16.msra.mxu0 0
  %8377 = vmatprep.subr.bf16.mxu0 0
  %8378 = vmatpush1.bf16.msra.mxu0 0
  %8379 = vmatprep.mubr.bf16.mxu0 0
  %8380 = vmatmul.mubr.bf16.gmra.mrb[0].mxu0 %v8275
  %v8381 = vpop.f32.mrb[0].mxu0
  %v8382 = vadd.f32 0.0, %v8381
  %v8383 = vpop.f32.mrb[0].mxu0
  %v8384 = vpop.f32.mrb[0].mxu0
  %v8385 = vadd.f32 0.0, %v8384
  %v8386 = vpop.f32.mrb[0].mxu0
  %8387 = vmatprep.mubr.bf16.mxu0 0
  %8388 = vmatmul.mubr.bf16.gmra.mrb[0].mxu0 %v8276
  %v8389 = vpop.f32.mrb[0].mxu0
  %v8390 = vadd.f32 0.0, %v8389
  %v8391 = vpop.f32.mrb[0].mxu0
  %v8392 = vpop.f32.mrb[0].mxu0
  %v8393 = vadd.f32 0.0, %v8392
  %v8394 = vpop.f32.mrb[0].mxu0
  %8395 = vmatprep.mubr.bf16.mxu0 0
  %8396 = vmatmul.mubr.bf16.gmra.mrb[0].mxu0 %v8277
  %v8397 = vpop.f32.mrb[0].mxu0
  %v8398 = vadd.f32 0.0, %v8397
  %v8399 = vpop.f32.mrb[0].mxu0
  %v8400 = vpop.f32.mrb[0].mxu0
  %v8401 = vadd.f32 0.0, %v8400
  %v8402 = vpop.f32.mrb[0].mxu0
  %8403 = vmatprep.mubr.bf16.mxu0 0
  %8404 = vmatmul.mubr.bf16.gmra.mrb[0].mxu0 %v8278
  %v8405 = vpop.f32.mrb[0].mxu0
  %v8406 = vadd.f32 0.0, %v8405
  %v8407 = vpop.f32.mrb[0].mxu0
  %v8408 = vpop.f32.mrb[0].mxu0
  %v8409 = vadd.f32 0.0, %v8408
  %v8410 = vpop.f32.mrb[0].mxu0
  %8411 = vmatprep.mubr.bf16.mxu0 0
  %8412 = vmatmul.mubr.bf16.gmra.mrb[0].mxu0 %v8279
  %v8413 = vpop.f32.mrb[0].mxu0
  %v8414 = vadd.f32 0.0, %v8413
  %v8415 = vpop.f32.mrb[0].mxu0
  %v8416 = vpop.f32.mrb[0].mxu0
  %v8417 = vadd.f32 0.0, %v8416
  %v8418 = vpop.f32.mrb[0].mxu0
  %8419 = vmatprep.mubr.bf16.mxu0 0
  %8420 = vmatmul.mubr.bf16.gmra.mrb[0].mxu0 %v8280
  %v8421 = vpop.f32.mrb[0].mxu0
  %v8422 = vadd.f32 0.0, %v8421
  %v8423 = vpop.f32.mrb[0].mxu0
  %v8424 = vpop.f32.mrb[0].mxu0
  %v8425 = vadd.f32 0.0, %v8424
  %v8426 = vpop.f32.mrb[0].mxu0
  %8427 = vmatprep.mubr.bf16.mxu0 0
  %8428 = vmatmul.mubr.bf16.gmra.mrb[0].mxu0 %v8281
  %v8429 = vpop.f32.mrb[0].mxu0
  %v8430 = vadd.f32 0.0, %v8429
  %v8431 = vpop.f32.mrb[0].mxu0
  %v8432 = vpop.f32.mrb[0].mxu0
  %v8433 = vpop.f32.mrb[0].mxu0
  %8434 = vdwg.mxu0
  %v8435 = vadd.f32 %v7911, %v8382
  %v8436 = vadd.f32 %v7912, %v8385
  %v8437 = vadd.f32 %v7913, %v8390
  %v8438 = vadd.f32 %v7914, %v8393
  %v8439 = vadd.f32 %v7915, %v8398
  %v8440 = vadd.f32 %v7916, %v8401
  %v8441 = vadd.f32 %v7917, %v8406
  %v8442 = vadd.f32 %v7918, %v8409
  %v8443 = vadd.f32 %v7919, %v8414
  %v8444 = vadd.f32 %v7920, %v8417
  %v8445 = vadd.f32 %v7921, %v8422
  %v8446 = vadd.f32 %v7922, %v8425
  %v8447 = vadd.f32 %v7923, %v8430
  %s8448 = scalar_lea.vmem %s3, 3120
  %v8449 = vld [vmem:[%s8448] sm:$0xff]
  %v8450 = vld [vmem:[%s8448 + $0x8] sm:$0xff]
  %v8451 = vld [vmem:[%s8448 + $0x10] sm:$0xff]
  %v8452 = vld [vmem:[%s8448 + $0x18] sm:$0xff]
  %v8453 = vld [vmem:[%s8448 + $0x20] sm:$0xff]
  %v8454 = vld [vmem:[%s8448 + $0x28] sm:$0xff]
  %v8455 = vld [vmem:[%s8448 + $0x30] sm:$0xff]
  %v8456 = vld [vmem:[%s8448 + $0x38] sm:$0xff]
  %v8457 = vld [vmem:[%s8448 + $0x40] sm:$0xff]
  %v8458 = vld [vmem:[%s8448 + $0x48] sm:$0xff]
  %v8459 = vld [vmem:[%s8448 + $0x50] sm:$0xff]
  %v8460 = vld [vmem:[%s8448 + $0x58] sm:$0xff]
  %v8461 = vld [vmem:[%s8448 + $0x60] sm:$0xff]
  %v8462 = vld [vmem:[%s8448 + $0x68] sm:$0xff]
  %v8463 = vld [vmem:[%s8448 + $0x70] sm:$0xff]
  %v8464 = vld [vmem:[%s8448 + $0x78] sm:$0xff]
  %v8465 = vld [vmem:[%s8448 + $0x80] sm:$0xff]
  %v8466 = vld [vmem:[%s8448 + $0x88] sm:$0xff]
  %v8467 = vld [vmem:[%s8448 + $0x90] sm:$0xff]
  %v8468 = vld [vmem:[%s8448 + $0x98] sm:$0xff]
  %v8469 = vld [vmem:[%s8448 + $0xa0] sm:$0xff]
  %v8470 = vld [vmem:[%s8448 + $0xa8] sm:$0xff]
  %v8471 = vld [vmem:[%s8448 + $0xb0] sm:$0xff]
  %v8472 = vld [vmem:[%s8448 + $0xb8] sm:$0xff]
  %v8473 = vld [vmem:[%s8448 + $0xc0] sm:$0xff]
  %v8474 = vld [vmem:[%s8448 + $0xc8] sm:$0xff]
  %v8501 = vunpack.c.l.b16 %v8449
  %v8502 = vunpack.c.h.b16 %v8449
  %v8503 = vunpack.c.l.b16 %v8450
  %v8504 = vunpack.c.h.b16 %v8450
  %v8505 = vunpack.c.l.b16 %v8451
  %v8506 = vunpack.c.h.b16 %v8451
  %v8507 = vunpack.c.l.b16 %v8452
  %v8508 = vunpack.c.h.b16 %v8452
  %v8509 = vunpack.c.l.b16 %v8453
  %v8510 = vunpack.c.h.b16 %v8453
  %v8511 = vunpack.c.l.b16 %v8454
  %v8512 = vunpack.c.h.b16 %v8454
  %v8513 = vunpack.c.l.b16 %v8455
  %v8514 = vunpack.c.h.b16 %v8455
  %v8515 = vunpack.c.l.b16 %v8456
  %v8516 = vunpack.c.h.b16 %v8456
  %v8517 = vunpack.c.l.b16 %v8457
  %v8518 = vunpack.c.h.b16 %v8457
  %v8519 = vunpack.c.l.b16 %v8458
  %v8520 = vunpack.c.h.b16 %v8458
  %v8521 = vunpack.c.l.b16 %v8459
  %v8522 = vunpack.c.h.b16 %v8459
  %v8523 = vunpack.c.l.b16 %v8460
  %v8524 = vunpack.c.h.b16 %v8460
  %v8525 = vunpack.c.l.b16 %v8461
  %v8526 = vunpack.c.h.b16 %v8461
  %v8527 = vunpack.c.l.b16 %v8462
  %v8528 = vunpack.c.h.b16 %v8462
  %v8529 = vunpack.c.l.b16 %v8463
  %v8530 = vunpack.c.h.b16 %v8463
  %v8531 = vunpack.c.l.b16 %v8464
  %v8532 = vunpack.c.h.b16 %v8464
  %v8533 = vunpack.c.l.b16 %v8465
  %v8534 = vunpack.c.h.b16 %v8465
  %v8535 = vunpack.c.l.b16 %v8466
  %v8536 = vunpack.c.h.b16 %v8466
  %v8537 = vunpack.c.l.b16 %v8467
  %v8538 = vunpack.c.h.b16 %v8467
  %v8539 = vunpack.c.l.b16 %v8468
  %v8540 = vunpack.c.h.b16 %v8468
  %v8541 = vunpack.c.l.b16 %v8469
  %v8542 = vunpack.c.h.b16 %v8469
  %v8543 = vunpack.c.l.b16 %v8470
  %v8544 = vunpack.c.h.b16 %v8470
  %v8545 = vunpack.c.l.b16 %v8471
  %v8546 = vunpack.c.h.b16 %v8471
  %v8547 = vunpack.c.l.b16 %v8472
  %v8548 = vunpack.c.h.b16 %v8472
  %v8549 = vunpack.c.l.b16 %v8473
  %v8550 = vunpack.c.h.b16 %v8473
  %v8551 = vunpack.c.l.b16 %v8474
  %v8552 = vunpack.c.h.b16 %v8474
  %v8553 = vpack.c.b16 %v8505, %v8501
  %v8554 = vpack.c.b16 %v8506, %v8502
  %v8555 = vpack.c.b16 %v8507, %v8503
  %v8556 = vpack.c.b16 %v8508, %v8504
  %v8557 = vpack.c.b16 %v8513, %v8509
  %v8558 = vpack.c.b16 %v8514, %v8510
  %v8559 = vpack.c.b16 %v8515, %v8511
  %v8560 = vpack.c.b16 %v8516, %v8512
  %v8561 = vpack.c.b16 %v8521, %v8517
  %v8562 = vpack.c.b16 %v8522, %v8518
  %v8563 = vpack.c.b16 %v8523, %v8519
  %v8564 = vpack.c.b16 %v8524, %v8520
  %v8565 = vpack.c.b16 %v8529, %v8525
  %v8566 = vpack.c.b16 %v8530, %v8526
  %v8567 = vpack.c.b16 %v8531, %v8527
  %v8568 = vpack.c.b16 %v8532, %v8528
  %v8569 = vpack.c.b16 %v8537, %v8533
  %v8570 = vpack.c.b16 %v8538, %v8534
  %v8571 = vpack.c.b16 %v8539, %v8535
  %v8572 = vpack.c.b16 %v8540, %v8536
  %v8573 = vpack.c.b16 %v8545, %v8541
  %v8574 = vpack.c.b16 %v8546, %v8542
  %v8575 = vpack.c.b16 %v8547, %v8543
  %v8576 = vpack.c.b16 %v8548, %v8544
  %v8577 = vpack.c.b16 %v8549, %v8549
  %v8578 = vpack.c.b16 %v8550, %v8550
  %v8579 = vpack.c.b16 %v8551, %v8551
  %v8580 = vpack.c.b16 %v8552, %v8552
  %v8603 = vsel %vm764, %v8556, 0
  %v8606 = vsel %vm764, %v8560, 0
  %v8609 = vsel %vm764, %v8564, 0
  %v8612 = vsel %vm764, %v8568, 0
  %v8615 = vsel %vm764, %v8572, 0
  %v8618 = vsel %vm764, %v8576, 0
  %v8621 = vsel %vm764, %v8580, 0
  %8623 = vmatprep.subr.bf16.mxu0 0
  %8624 = vmatpush1.bf16.msra.mxu0 %v586
  %8625 = vmatprep.subr.bf16.mxu0 0
  %8626 = vmatpush1.bf16.msra.mxu0 %v587
  %8627 = vmatprep.subr.bf16.mxu0 0
  %8628 = vmatpush1.bf16.msra.mxu0 %v588
  %8629 = vmatprep.subr.bf16.mxu0 0
  %8630 = vmatpush1.bf16.msra.mxu0 %v589
  %8631 = vmatprep.subr.bf16.mxu0 0
  %8632 = vmatpush1.bf16.msra.mxu0 %v590
  %8633 = vmatprep.subr.bf16.mxu0 0
  %8634 = vmatpush1.bf16.msra.mxu0 %v591
  %8635 = vmatprep.subr.bf16.mxu0 0
  %8636 = vmatpush1.bf16.msra.mxu0 %v592
  %8637 = vmatprep.subr.bf16.mxu0 0
  %8638 = vmatpush1.bf16.msra.mxu0 %v593
  %8639 = vmatprep.subr.bf16.mxu0 0
  %8640 = vmatpush1.bf16.msra.mxu0 %v594
  %8641 = vmatprep.subr.bf16.mxu0 0
  %8642 = vmatpush1.bf16.msra.mxu0 %v595
  %8643 = vmatprep.subr.bf16.mxu0 0
  %8644 = vmatpush1.bf16.msra.mxu0 %v596
  %8645 = vmatprep.subr.bf16.mxu0 0
  %8646 = vmatpush1.bf16.msra.mxu0 %v597
  %8647 = vmatprep.subr.bf16.mxu0 0
  %8648 = vmatpush1.bf16.msra.mxu0 %v598
  %8649 = vmatprep.subr.bf16.mxu0 0
  %8650 = vmatpush1.bf16.msra.mxu0 %v599
  %8651 = vmatprep.subr.bf16.mxu0 0
  %8652 = vmatpush1.bf16.msra.mxu0 %v600
  %8653 = vmatprep.subr.bf16.mxu0 0
  %8654 = vmatpush1.bf16.msra.mxu0 %v601
  %8655 = vmatprep.mubr.bf16.mxu0 %v8554
  %8656 = vmatmul.mubr.bf16.gmra.mrb[0].mxu0 %v8553
  %v8657 = vpop.f32.mrb[0].mxu0
  %v8658 = vadd.f32 0.0, %v8657
  %v8659 = vpop.f32.mrb[0].mxu0
  %v8660 = vpop.f32.mrb[0].mxu0
  %v8661 = vadd.f32 0.0, %v8660
  %v8662 = vpop.f32.mrb[0].mxu0
  %8663 = vmatprep.mubr.bf16.mxu0 %v8558
  %8664 = vmatmul.mubr.bf16.gmra.mrb[0].mxu0 %v8557
  %v8665 = vpop.f32.mrb[0].mxu0
  %v8666 = vadd.f32 0.0, %v8665
  %v8667 = vpop.f32.mrb[0].mxu0
  %v8668 = vpop.f32.mrb[0].mxu0
  %v8669 = vadd.f32 0.0, %v8668
  %v8670 = vpop.f32.mrb[0].mxu0
  %8671 = vmatprep.mubr.bf16.mxu0 %v8562
  %8672 = vmatmul.mubr.bf16.gmra.mrb[0].mxu0 %v8561
  %v8673 = vpop.f32.mrb[0].mxu0
  %v8674 = vadd.f32 0.0, %v8673
  %v8675 = vpop.f32.mrb[0].mxu0
  %v8676 = vpop.f32.mrb[0].mxu0
  %v8677 = vadd.f32 0.0, %v8676
  %v8678 = vpop.f32.mrb[0].mxu0
  %8679 = vmatprep.mubr.bf16.mxu0 %v8566
  %8680 = vmatmul.mubr.bf16.gmra.mrb[0].mxu0 %v8565
  %v8681 = vpop.f32.mrb[0].mxu0
  %v8682 = vadd.f32 0.0, %v8681
  %v8683 = vpop.f32.mrb[0].mxu0
  %v8684 = vpop.f32.mrb[0].mxu0
  %v8685 = vadd.f32 0.0, %v8684
  %v8686 = vpop.f32.mrb[0].mxu0
  %8687 = vmatprep.mubr.bf16.mxu0 %v8570
  %8688 = vmatmul.mubr.bf16.gmra.mrb[0].mxu0 %v8569
  %v8689 = vpop.f32.mrb[0].mxu0
  %v8690 = vadd.f32 0.0, %v8689
  %v8691 = vpop.f32.mrb[0].mxu0
  %v8692 = vpop.f32.mrb[0].mxu0
  %v8693 = vadd.f32 0.0, %v8692
  %v8694 = vpop.f32.mrb[0].mxu0
  %8695 = vmatprep.mubr.bf16.mxu0 %v8574
  %8696 = vmatmul.mubr.bf16.gmra.mrb[0].mxu0 %v8573
  %v8697 = vpop.f32.mrb[0].mxu0
  %v8698 = vadd.f32 0.0, %v8697
  %v8699 = vpop.f32.mrb[0].mxu0
  %v8700 = vpop.f32.mrb[0].mxu0
  %v8701 = vadd.f32 0.0, %v8700
  %v8702 = vpop.f32.mrb[0].mxu0
  %8703 = vmatprep.mubr.bf16.mxu0 %v8578
  %8704 = vmatmul.mubr.bf16.gmra.mrb[0].mxu0 %v8577
  %v8705 = vpop.f32.mrb[0].mxu0
  %v8706 = vadd.f32 0.0, %v8705
  %v8707 = vpop.f32.mrb[0].mxu0
  %v8708 = vpop.f32.mrb[0].mxu0
  %v8709 = vpop.f32.mrb[0].mxu0
  %8710 = vdwg.mxu0
  %8711 = vmatprep.subr.bf16.mxu0 0
  %8712 = vmatpush1.bf16.msra.mxu0 %v602
  %8713 = vmatprep.subr.bf16.mxu0 0
  %8714 = vmatpush1.bf16.msra.mxu0 %v603
  %8715 = vmatprep.subr.bf16.mxu0 0
  %8716 = vmatpush1.bf16.msra.mxu0 %v604
  %8717 = vmatprep.subr.bf16.mxu0 0
  %8718 = vmatpush1.bf16.msra.mxu0 %v605
  %8719 = vmatprep.subr.bf16.mxu0 0
  %8720 = vmatpush1.bf16.msra.mxu0 %v606
  %8721 = vmatprep.subr.bf16.mxu0 0
  %8722 = vmatpush1.bf16.msra.mxu0 %v607
  %8723 = vmatprep.subr.bf16.mxu0 0
  %8724 = vmatpush1.bf16.msra.mxu0 %v608
  %8725 = vmatprep.subr.bf16.mxu0 0
  %8726 = vmatpush1.bf16.msra.mxu0 %v609
  %8727 = vmatprep.subr.bf16.mxu0 0
  %8728 = vmatpush1.bf16.msra.mxu0 %v788
  %8729 = vmatprep.subr.bf16.mxu0 0
  %8730 = vmatpush1.bf16.msra.mxu0 0
  %8731 = vmatprep.subr.bf16.mxu0 0
  %8732 = vmatpush1.bf16.msra.mxu0 0
  %8733 = vmatprep.subr.bf16.mxu0 0
  %8734 = vmatpush1.bf16.msra.mxu0 0
  %8735 = vmatprep.subr.bf16.mxu0 0
  %8736 = vmatpush1.bf16.msra.mxu0 0
  %8737 = vmatprep.subr.bf16.mxu0 0
  %8738 = vmatpush1.bf16.msra.mxu0 0
  %8739 = vmatprep.subr.bf16.mxu0 0
  %8740 = vmatpush1.bf16.msra.mxu0 0
  %8741 = vmatprep.subr.bf16.mxu0 0
  %8742 = vmatpush1.bf16.msra.mxu0 0
  %8743 = vmatprep.mubr.bf16.mxu0 %v8603
  %8744 = vmatmul.mubr.bf16.gmra.mrb[0].mxu0 %v8555
  %v8745 = vpop.f32.mrb[0].mxu0
  %v8746 = vadd.f32 %v8658, %v8745
  %v8747 = vpop.f32.mrb[0].mxu0
  %v8748 = vpop.f32.mrb[0].mxu0
  %v8749 = vadd.f32 %v8661, %v8748
  %v8750 = vpop.f32.mrb[0].mxu0
  %8751 = vmatprep.mubr.bf16.mxu0 %v8606
  %8752 = vmatmul.mubr.bf16.gmra.mrb[0].mxu0 %v8559
  %v8753 = vpop.f32.mrb[0].mxu0
  %v8754 = vadd.f32 %v8666, %v8753
  %v8755 = vpop.f32.mrb[0].mxu0
  %v8756 = vpop.f32.mrb[0].mxu0
  %v8757 = vadd.f32 %v8669, %v8756
  %v8758 = vpop.f32.mrb[0].mxu0
  %8759 = vmatprep.mubr.bf16.mxu0 %v8609
  %8760 = vmatmul.mubr.bf16.gmra.mrb[0].mxu0 %v8563
  %v8761 = vpop.f32.mrb[0].mxu0
  %v8762 = vadd.f32 %v8674, %v8761
  %v8763 = vpop.f32.mrb[0].mxu0
  %v8764 = vpop.f32.mrb[0].mxu0
  %v8765 = vadd.f32 %v8677, %v8764
  %v8766 = vpop.f32.mrb[0].mxu0
  %8767 = vmatprep.mubr.bf16.mxu0 %v8612
  %8768 = vmatmul.mubr.bf16.gmra.mrb[0].mxu0 %v8567
  %v8769 = vpop.f32.mrb[0].mxu0
  %v8770 = vadd.f32 %v8682, %v8769
  %v8771 = vpop.f32.mrb[0].mxu0
  %v8772 = vpop.f32.mrb[0].mxu0
  %v8773 = vadd.f32 %v8685, %v8772
  %v8774 = vpop.f32.mrb[0].mxu0
  %8775 = vmatprep.mubr.bf16.mxu0 %v8615
  %8776 = vmatmul.mubr.bf16.gmra.mrb[0].mxu0 %v8571
  %v8777 = vpop.f32.mrb[0].mxu0
  %v8778 = vadd.f32 %v8690, %v8777
  %v8779 = vpop.f32.mrb[0].mxu0
  %v8780 = vpop.f32.mrb[0].mxu0
  %v8781 = vadd.f32 %v8693, %v8780
  %v8782 = vpop.f32.mrb[0].mxu0
  %8783 = vmatprep.mubr.bf16.mxu0 %v8618
  %8784 = vmatmul.mubr.bf16.gmra.mrb[0].mxu0 %v8575
  %v8785 = vpop.f32.mrb[0].mxu0
  %v8786 = vadd.f32 %v8698, %v8785
  %v8787 = vpop.f32.mrb[0].mxu0
  %v8788 = vpop.f32.mrb[0].mxu0
  %v8789 = vadd.f32 %v8701, %v8788
  %v8790 = vpop.f32.mrb[0].mxu0
  %8791 = vmatprep.mubr.bf16.mxu0 %v8621
  %8792 = vmatmul.mubr.bf16.gmra.mrb[0].mxu0 %v8579
  %v8793 = vpop.f32.mrb[0].mxu0
  %v8794 = vadd.f32 %v8706, %v8793
  %v8795 = vpop.f32.mrb[0].mxu0
  %v8796 = vpop.f32.mrb[0].mxu0
  %v8797 = vpop.f32.mrb[0].mxu0
  %8798 = vdwg.mxu0
  %v8799 = vpack.c.bf16 %v8749, %v8746
  %v8800 = vpack.c.bf16 %v8757, %v8754
  %v8801 = vpack.c.bf16 %v8765, %v8762
  %v8802 = vpack.c.bf16 %v8773, %v8770
  %v8803 = vpack.c.bf16 %v8781, %v8778
  %v8804 = vpack.c.bf16 %v8789, %v8786
  %v8805 = vpack.c.bf16 %v8794, %v8794
  %s8806 = scalar_lea.vmem %s4, 960
  %v8807 = vld [vmem:[%s8806] sm:$0xf]
  %v8808 = vld [vmem:[%s8806 + $0x4] sm:$0xf]
  %v8809 = vld [vmem:[%s8806 + $0x8] sm:$0xf]
  %v8810 = vld [vmem:[%s8806 + $0xc] sm:$0xf]
  %v8811 = vld [vmem:[%s8806 + $0x10] sm:$0xf]
  %v8812 = vld [vmem:[%s8806 + $0x14] sm:$0xf]
  %v8813 = vld [vmem:[%s8806 + $0x18] sm:$0xf]
  %v8814 = vld [vmem:[%s8806 + $0x1c] sm:$0xf]
  %v8815 = vld [vmem:[%s8806 + $0x20] sm:$0xf]
  %v8816 = vld [vmem:[%s8806 + $0x24] sm:$0xf]
  %v8817 = vld [vmem:[%s8806 + $0x28] sm:$0xf]
  %v8818 = vld [vmem:[%s8806 + $0x2c] sm:$0xf]
  %v8819 = vld [vmem:[%s8806 + $0x30] sm:$0xf]
  %v8820 = vld [vmem:[%s8806 + $0x34] sm:$0xf]
  %v8821 = vld [vmem:[%s8806 + $0x38] sm:$0xf]
  %v8822 = vld [vmem:[%s8806 + $0x3c] sm:$0xf]
  %v8839 = vunpack.c.l.b16 %v8807
  %v8840 = vunpack.c.l.b16 %v8808
  %v8841 = vunpack.c.l.b16 %v8809
  %v8842 = vunpack.c.l.b16 %v8810
  %v8843 = vunpack.c.l.b16 %v8811
  %v8844 = vunpack.c.l.b16 %v8812
  %v8845 = vunpack.c.l.b16 %v8813
  %v8846 = vunpack.c.l.b16 %v8814
  %v8847 = vunpack.c.l.b16 %v8815
  %v8848 = vunpack.c.l.b16 %v8816
  %v8849 = vunpack.c.l.b16 %v8817
  %v8850 = vunpack.c.l.b16 %v8818
  %v8851 = vunpack.c.l.b16 %v8819
  %v8852 = vunpack.c.l.b16 %v8820
  %v8853 = vunpack.c.l.b16 %v8821
  %v8854 = vunpack.c.l.b16 %v8822
  %v8855 = vpack.c.b16 %v8840, %v8839
  %v8856 = vpack.c.b16 %v8842, %v8841
  %v8857 = vpack.c.b16 %v8844, %v8843
  %v8858 = vpack.c.b16 %v8846, %v8845
  %v8859 = vpack.c.b16 %v8848, %v8847
  %v8860 = vpack.c.b16 %v8850, %v8849
  %v8861 = vpack.c.b16 %v8852, %v8851
  %v8862 = vpack.c.b16 %v8854, %v8853
  %8871 = vmatprep.subr.bf16.mxu0 0
  %8872 = vmatpush1.bf16.msra.mxu0 %v8855
  %8873 = vmatprep.subr.bf16.mxu0 0
  %8874 = vmatpush1.bf16.msra.mxu0 %v8856
  %8875 = vmatprep.subr.bf16.mxu0 0
  %8876 = vmatpush1.bf16.msra.mxu0 %v8857
  %8877 = vmatprep.subr.bf16.mxu0 0
  %8878 = vmatpush1.bf16.msra.mxu0 %v8858
  %8879 = vmatprep.subr.bf16.mxu0 0
  %8880 = vmatpush1.bf16.msra.mxu0 %v8859
  %8881 = vmatprep.subr.bf16.mxu0 0
  %8882 = vmatpush1.bf16.msra.mxu0 %v8860
  %8883 = vmatprep.subr.bf16.mxu0 0
  %8884 = vmatpush1.bf16.msra.mxu0 %v8861
  %8885 = vmatprep.subr.bf16.mxu0 0
  %8886 = vmatpush1.bf16.msra.mxu0 %v8862
  %8887 = vmatprep.subr.bf16.mxu0 0
  %8888 = vmatpush1.bf16.msra.mxu0 0
  %8889 = vmatprep.subr.bf16.mxu0 0
  %8890 = vmatpush1.bf16.msra.mxu0 0
  %8891 = vmatprep.subr.bf16.mxu0 0
  %8892 = vmatpush1.bf16.msra.mxu0 0
  %8893 = vmatprep.subr.bf16.mxu0 0
  %8894 = vmatpush1.bf16.msra.mxu0 0
  %8895 = vmatprep.subr.bf16.mxu0 0
  %8896 = vmatpush1.bf16.msra.mxu0 0
  %8897 = vmatprep.subr.bf16.mxu0 0
  %8898 = vmatpush1.bf16.msra.mxu0 0
  %8899 = vmatprep.subr.bf16.mxu0 0
  %8900 = vmatpush1.bf16.msra.mxu0 0
  %8901 = vmatprep.subr.bf16.mxu0 0
  %8902 = vmatpush1.bf16.msra.mxu0 0
  %8903 = vmatprep.mubr.bf16.mxu0 0
  %8904 = vmatmul.mubr.bf16.gmra.mrb[0].mxu0 %v8799
  %v8905 = vpop.f32.mrb[0].mxu0
  %v8906 = vadd.f32 0.0, %v8905
  %v8907 = vpop.f32.mrb[0].mxu0
  %v8908 = vpop.f32.mrb[0].mxu0
  %v8909 = vadd.f32 0.0, %v8908
  %v8910 = vpop.f32.mrb[0].mxu0
  %8911 = vmatprep.mubr.bf16.mxu0 0
  %8912 = vmatmul.mubr.bf16.gmra.mrb[0].mxu0 %v8800
  %v8913 = vpop.f32.mrb[0].mxu0
  %v8914 = vadd.f32 0.0, %v8913
  %v8915 = vpop.f32.mrb[0].mxu0
  %v8916 = vpop.f32.mrb[0].mxu0
  %v8917 = vadd.f32 0.0, %v8916
  %v8918 = vpop.f32.mrb[0].mxu0
  %8919 = vmatprep.mubr.bf16.mxu0 0
  %8920 = vmatmul.mubr.bf16.gmra.mrb[0].mxu0 %v8801
  %v8921 = vpop.f32.mrb[0].mxu0
  %v8922 = vadd.f32 0.0, %v8921
  %v8923 = vpop.f32.mrb[0].mxu0
  %v8924 = vpop.f32.mrb[0].mxu0
  %v8925 = vadd.f32 0.0, %v8924
  %v8926 = vpop.f32.mrb[0].mxu0
  %8927 = vmatprep.mubr.bf16.mxu0 0
  %8928 = vmatmul.mubr.bf16.gmra.mrb[0].mxu0 %v8802
  %v8929 = vpop.f32.mrb[0].mxu0
  %v8930 = vadd.f32 0.0, %v8929
  %v8931 = vpop.f32.mrb[0].mxu0
  %v8932 = vpop.f32.mrb[0].mxu0
  %v8933 = vadd.f32 0.0, %v8932
  %v8934 = vpop.f32.mrb[0].mxu0
  %8935 = vmatprep.mubr.bf16.mxu0 0
  %8936 = vmatmul.mubr.bf16.gmra.mrb[0].mxu0 %v8803
  %v8937 = vpop.f32.mrb[0].mxu0
  %v8938 = vadd.f32 0.0, %v8937
  %v8939 = vpop.f32.mrb[0].mxu0
  %v8940 = vpop.f32.mrb[0].mxu0
  %v8941 = vadd.f32 0.0, %v8940
  %v8942 = vpop.f32.mrb[0].mxu0
  %8943 = vmatprep.mubr.bf16.mxu0 0
  %8944 = vmatmul.mubr.bf16.gmra.mrb[0].mxu0 %v8804
  %v8945 = vpop.f32.mrb[0].mxu0
  %v8946 = vadd.f32 0.0, %v8945
  %v8947 = vpop.f32.mrb[0].mxu0
  %v8948 = vpop.f32.mrb[0].mxu0
  %v8949 = vadd.f32 0.0, %v8948
  %v8950 = vpop.f32.mrb[0].mxu0
  %8951 = vmatprep.mubr.bf16.mxu0 0
  %8952 = vmatmul.mubr.bf16.gmra.mrb[0].mxu0 %v8805
  %v8953 = vpop.f32.mrb[0].mxu0
  %v8954 = vadd.f32 0.0, %v8953
  %v8955 = vpop.f32.mrb[0].mxu0
  %v8956 = vpop.f32.mrb[0].mxu0
  %v8957 = vpop.f32.mrb[0].mxu0
  %8958 = vdwg.mxu0
  %v8959 = vadd.f32 %v8435, %v8906
  %v8960 = vadd.f32 %v8436, %v8909
  %v8961 = vadd.f32 %v8437, %v8914
  %v8962 = vadd.f32 %v8438, %v8917
  %v8963 = vadd.f32 %v8439, %v8922
  %v8964 = vadd.f32 %v8440, %v8925
  %v8965 = vadd.f32 %v8441, %v8930
  %v8966 = vadd.f32 %v8442, %v8933
  %v8967 = vadd.f32 %v8443, %v8938
  %v8968 = vadd.f32 %v8444, %v8941
  %v8969 = vadd.f32 %v8445, %v8946
  %v8970 = vadd.f32 %v8446, %v8949
  %v8971 = vadd.f32 %v8447, %v8954
  %v8972 = vld [vmem:[%s5] sm:$0x1]
  %v8974 = vlaneseq
  %v8975 = vshrl.u32 %v8974, 7
  %v8976 = vsub.s32 0, %v8975
  %v8977 = vrot.slane %v8972, %v8976
  %v8979 = vadd.f32 %v8959, %v8977
  %v8980 = vadd.f32 %v8960, %v8977
  %v8981 = vadd.f32 %v8961, %v8977
  %v8982 = vadd.f32 %v8962, %v8977
  %v8983 = vadd.f32 %v8963, %v8977
  %v8984 = vadd.f32 %v8964, %v8977
  %v8985 = vadd.f32 %v8965, %v8977
  %v8986 = vadd.f32 %v8966, %v8977
  %v8987 = vadd.f32 %v8967, %v8977
  %v8988 = vadd.f32 %v8968, %v8977
  %v8989 = vadd.f32 %v8969, %v8977
  %v8990 = vadd.f32 %v8970, %v8977
  %v8991 = vadd.f32 %v8971, %v8977
  %v8992 = vmax.f32 %v8979, 0.0
  %v8993 = vmax.f32 %v8980, 0.0
  %v8994 = vmax.f32 %v8981, 0.0
  %v8995 = vmax.f32 %v8982, 0.0
  %v8996 = vmax.f32 %v8983, 0.0
  %v8997 = vmax.f32 %v8984, 0.0
  %v8998 = vmax.f32 %v8985, 0.0
  %v8999 = vmax.f32 %v8986, 0.0
  %v9000 = vmax.f32 %v8987, 0.0
  %v9001 = vmax.f32 %v8988, 0.0
  %v9002 = vmax.f32 %v8989, 0.0
  %v9003 = vmax.f32 %v8990, 0.0
  %v9004 = vmax.f32 %v8991, 0.0
  %v9005 = vpack.c.bf16 %v8993, %v8992
  %v9006 = vpack.c.bf16 %v8995, %v8994
  %v9007 = vpack.c.bf16 %v8997, %v8996
  %v9008 = vpack.c.bf16 %v8999, %v8998
  %v9009 = vpack.c.bf16 %v9001, %v9000
  %v9010 = vpack.c.bf16 %v9003, %v9002
  %v9011 = vpack.c.bf16 %v9004, %v9004
  %v9012 = vld [vmem:[%s6] sm:$0xf]
  %v9013 = vld [vmem:[%s6 + $0x4] sm:$0xf]
  %v9014 = vld [vmem:[%s6 + $0x8] sm:$0xf]
  %v9018 = vunpack.c.l.b16 %v9012
  %v9019 = vunpack.c.l.b16 %v9013
  %v9020 = vunpack.c.l.b16 %v9014
  %v9021 = vpack.c.b16 %v9019, %v9018
  %v9022 = vpack.c.b16 %v9020, %v9020
  %vm9023 = vcmask 850944
  %v9025 = vsel %vm9023, %v9021, 0
  %v9028 = vsel %vm9023, %v9022, 0
  %v9031 = vsel %vm786, %v9011, 0
  %9033 = vmatprep.subr.bf16.mxu0 0
  %9034 = vmatpush1.bf16.msra.mxu0 %v9005
  %9035 = vmatprep.subr.bf16.mxu0 0
  %9036 = vmatpush1.bf16.msra.mxu0 %v9006
  %9037 = vmatprep.subr.bf16.mxu0 0
  %9038 = vmatpush1.bf16.msra.mxu0 %v9007
  %9039 = vmatprep.subr.bf16.mxu0 0
  %9040 = vmatpush1.bf16.msra.mxu0 %v9008
  %9041 = vmatprep.subr.bf16.mxu0 0
  %9042 = vmatpush1.bf16.msra.mxu0 %v9009
  %9043 = vmatprep.subr.bf16.mxu0 0
  %9044 = vmatpush1.bf16.msra.mxu0 %v9010
  %9045 = vmatprep.subr.bf16.mxu0 0
  %9046 = vmatpush1.bf16.msra.mxu0 %v9031
  %9047 = vmatprep.subr.bf16.mxu0 0
  %9048 = vmatpush1.bf16.msra.mxu0 0
  %9049 = vmatprep.subr.bf16.mxu0 0
  %9050 = vmatpush1.bf16.msra.mxu0 0
  %9051 = vmatprep.subr.bf16.mxu0 0
  %9052 = vmatpush1.bf16.msra.mxu0 0
  %9053 = vmatprep.subr.bf16.mxu0 0
  %9054 = vmatpush1.bf16.msra.mxu0 0
  %9055 = vmatprep.subr.bf16.mxu0 0
  %9056 = vmatpush1.bf16.msra.mxu0 0
  %9057 = vmatprep.subr.bf16.mxu0 0
  %9058 = vmatpush1.bf16.msra.mxu0 0
  %9059 = vmatprep.subr.bf16.mxu0 0
  %9060 = vmatpush1.bf16.msra.mxu0 0
  %9061 = vmatprep.subr.bf16.mxu0 0
  %9062 = vmatpush1.bf16.msra.mxu0 0
  %9063 = vmatprep.subr.bf16.mxu0 0
  %9064 = vmatpush1.bf16.msra.mxu0 0
  %9065 = vmatprep.mubr.bf16.mxu0 0
  %9066 = vmatmul.mubr.bf16.gmra.mrb[0].mxu0 %v9025
  %v9067 = vpop.f32.mrb[0].mxu0
  %v9068 = vadd.f32 0.0, %v9067
  %v9069 = vpop.f32.mrb[0].mxu0
  %v9070 = vpop.f32.mrb[0].mxu0
  %v9071 = vadd.f32 0.0, %v9070
  %v9072 = vpop.f32.mrb[0].mxu0
  %9073 = vmatprep.mubr.bf16.mxu0 0
  %9074 = vmatmul.mubr.bf16.gmra.mrb[0].mxu0 %v9028
  %v9075 = vpop.f32.mrb[0].mxu0
  %v9076 = vadd.f32 0.0, %v9075
  %v9077 = vpop.f32.mrb[0].mxu0
  %v9078 = vpop.f32.mrb[0].mxu0
  %v9079 = vpop.f32.mrb[0].mxu0
  %9080 = vdwg.mxu0
  %v9081 = vpack.c.bf16 %v9071, %v9068
  %v9082 = vpack.c.bf16 %v9076, %v9076
  %v9083 = vld [vmem:[%s7] sm:$0xf]
  %v9084 = vld [vmem:[%s7 + $0x4] sm:$0xf]
  %v9085 = vld [vmem:[%s7 + $0x8] sm:$0xf]
  %v9086 = vld [vmem:[%s7 + $0xc] sm:$0xf]
  %v9087 = vld [vmem:[%s7 + $0x10] sm:$0xf]
  %v9088 = vld [vmem:[%s7 + $0x14] sm:$0xf]
  %v9089 = vld [vmem:[%s7 + $0x18] sm:$0xf]
  %v9090 = vld [vmem:[%s7 + $0x1c] sm:$0xf]
  %v9091 = vld [vmem:[%s7 + $0x20] sm:$0xf]
  %v9092 = vld [vmem:[%s7 + $0x24] sm:$0xf]
  %v9093 = vld [vmem:[%s7 + $0x28] sm:$0xf]
  %v9094 = vld [vmem:[%s7 + $0x2c] sm:$0xf]
  %v9095 = vld [vmem:[%s7 + $0x30] sm:$0xf]
  %v9096 = vld [vmem:[%s7 + $0x34] sm:$0xf]
  %v9097 = vld [vmem:[%s7 + $0x38] sm:$0xf]
  %v9098 = vld [vmem:[%s7 + $0x3c] sm:$0xf]
  %s9099 = scalar_lea.vmem %s6, 12
  %v9100 = vld [vmem:[%s9099] sm:$0xf]
  %v9101 = vld [vmem:[%s9099 + $0x4] sm:$0xf]
  %v9102 = vld [vmem:[%s9099 + $0x8] sm:$0xf]
  %v9106 = vunpack.c.l.b16 %v9100
  %v9107 = vunpack.c.l.b16 %v9101
  %v9108 = vunpack.c.l.b16 %v9102
  %v9109 = vpack.c.b16 %v9107, %v9106
  %v9110 = vpack.c.b16 %v9108, %v9108
  %v9112 = vsel %vm9023, %v9109, 0
  %v9115 = vsel %vm9023, %v9110, 0
  %9117 = vmatprep.subr.bf16.mxu0 0
  %9118 = vmatpush1.bf16.msra.mxu0 %v9005
  %9119 = vmatprep.subr.bf16.mxu0 0
  %9120 = vmatpush1.bf16.msra.mxu0 %v9006
  %9121 = vmatprep.subr.bf16.mxu0 0
  %9122 = vmatpush1.bf16.msra.mxu0 %v9007
  %9123 = vmatprep.subr.bf16.mxu0 0
  %9124 = vmatpush1.bf16.msra.mxu0 %v9008
  %9125 = vmatprep.subr.bf16.mxu0 0
  %9126 = vmatpush1.bf16.msra.mxu0 %v9009
  %9127 = vmatprep.subr.bf16.mxu0 0
  %9128 = vmatpush1.bf16.msra.mxu0 %v9010
  %9129 = vmatprep.subr.bf16.mxu0 0
  %9130 = vmatpush1.bf16.msra.mxu0 %v9031
  %9131 = vmatprep.subr.bf16.mxu0 0
  %9132 = vmatpush1.bf16.msra.mxu0 0
  %9133 = vmatprep.subr.bf16.mxu0 0
  %9134 = vmatpush1.bf16.msra.mxu0 0
  %9135 = vmatprep.subr.bf16.mxu0 0
  %9136 = vmatpush1.bf16.msra.mxu0 0
  %9137 = vmatprep.subr.bf16.mxu0 0
  %9138 = vmatpush1.bf16.msra.mxu0 0
  %9139 = vmatprep.subr.bf16.mxu0 0
  %9140 = vmatpush1.bf16.msra.mxu0 0
  %9141 = vmatprep.subr.bf16.mxu0 0
  %9142 = vmatpush1.bf16.msra.mxu0 0
  %9143 = vmatprep.subr.bf16.mxu0 0
  %9144 = vmatpush1.bf16.msra.mxu0 0
  %9145 = vmatprep.subr.bf16.mxu0 0
  %9146 = vmatpush1.bf16.msra.mxu0 0
  %9147 = vmatprep.subr.bf16.mxu0 0
  %9148 = vmatpush1.bf16.msra.mxu0 0
  %9149 = vmatprep.mubr.bf16.mxu0 0
  %9150 = vmatmul.mubr.bf16.gmra.mrb[0].mxu0 %v9112
  %v9151 = vpop.f32.mrb[0].mxu0
  %v9152 = vadd.f32 0.0, %v9151
  %v9153 = vpop.f32.mrb[0].mxu0
  %v9154 = vpop.f32.mrb[0].mxu0
  %v9155 = vadd.f32 0.0, %v9154
  %v9156 = vpop.f32.mrb[0].mxu0
  %9157 = vmatprep.mubr.bf16.mxu0 0
  %9158 = vmatmul.mubr.bf16.gmra.mrb[0].mxu0 %v9115
  %v9159 = vpop.f32.mrb[0].mxu0
  %v9160 = vadd.f32 0.0, %v9159
  %v9161 = vpop.f32.mrb[0].mxu0
  %v9162 = vpop.f32.mrb[0].mxu0
  %v9163 = vpop.f32.mrb[0].mxu0
  %9164 = vdwg.mxu0
  %v9165 = vpack.c.bf16 %v9155, %v9152
  %v9166 = vpack.c.bf16 %v9160, %v9160
  %s9167 = scalar_lea.vmem %s7, 64
  %v9168 = vld [vmem:[%s9167] sm:$0xf]
  %v9169 = vld [vmem:[%s9167 + $0x4] sm:$0xf]
  %v9170 = vld [vmem:[%s9167 + $0x8] sm:$0xf]
  %v9171 = vld [vmem:[%s9167 + $0xc] sm:$0xf]
  %v9172 = vld [vmem:[%s9167 + $0x10] sm:$0xf]
  %v9173 = vld [vmem:[%s9167 + $0x14] sm:$0xf]
  %v9174 = vld [vmem:[%s9167 + $0x18] sm:$0xf]
  %v9175 = vld [vmem:[%s9167 + $0x1c] sm:$0xf]
  %v9176 = vld [vmem:[%s9167 + $0x20] sm:$0xf]
  %v9177 = vld [vmem:[%s9167 + $0x24] sm:$0xf]
  %v9178 = vld [vmem:[%s9167 + $0x28] sm:$0xf]
  %v9179 = vld [vmem:[%s9167 + $0x2c] sm:$0xf]
  %v9180 = vld [vmem:[%s9167 + $0x30] sm:$0xf]
  %v9181 = vld [vmem:[%s9167 + $0x34] sm:$0xf]
  %v9182 = vld [vmem:[%s9167 + $0x38] sm:$0xf]
  %v9183 = vld [vmem:[%s9167 + $0x3c] sm:$0xf]
  %v9200 = vunpack.c.l.b16 %v9168
  %v9201 = vunpack.c.l.b16 %v9169
  %v9202 = vunpack.c.l.b16 %v9170
  %v9203 = vunpack.c.l.b16 %v9171
  %v9204 = vunpack.c.l.b16 %v9172
  %v9205 = vunpack.c.l.b16 %v9173
  %v9206 = vunpack.c.l.b16 %v9174
  %v9207 = vunpack.c.l.b16 %v9175
  %v9208 = vunpack.c.l.b16 %v9176
  %v9209 = vunpack.c.l.b16 %v9177
  %v9210 = vunpack.c.l.b16 %v9178
  %v9211 = vunpack.c.l.b16 %v9179
  %v9212 = vunpack.c.l.b16 %v9180
  %v9213 = vunpack.c.l.b16 %v9181
  %v9214 = vunpack.c.l.b16 %v9182
  %v9215 = vunpack.c.l.b16 %v9183
  %v9216 = vpack.c.b16 %v9201, %v9200
  %v9217 = vpack.c.b16 %v9203, %v9202
  %v9218 = vpack.c.b16 %v9205, %v9204
  %v9219 = vpack.c.b16 %v9207, %v9206
  %v9220 = vpack.c.b16 %v9209, %v9208
  %v9221 = vpack.c.b16 %v9211, %v9210
  %v9222 = vpack.c.b16 %v9213, %v9212
  %v9223 = vpack.c.b16 %v9215, %v9214
  %9232 = vmatprep.subr.bf16.mxu0 0
  %9233 = vmatpush1.bf16.msra.mxu0 %v9216
  %9234 = vmatprep.subr.bf16.mxu0 0
  %9235 = vmatpush1.bf16.msra.mxu0 %v9217
  %9236 = vmatprep.subr.bf16.mxu0 0
  %9237 = vmatpush1.bf16.msra.mxu0 %v9218
  %9238 = vmatprep.subr.bf16.mxu0 0
  %9239 = vmatpush1.bf16.msra.mxu0 %v9219
  %9240 = vmatprep.subr.bf16.mxu0 0
  %9241 = vmatpush1.bf16.msra.mxu0 %v9220
  %9242 = vmatprep.subr.bf16.mxu0 0
  %9243 = vmatpush1.bf16.msra.mxu0 %v9221
  %9244 = vmatprep.subr.bf16.mxu0 0
  %9245 = vmatpush1.bf16.msra.mxu0 %v9222
  %9246 = vmatprep.subr.bf16.mxu0 0
  %9247 = vmatpush1.bf16.msra.mxu0 %v9223
  %9248 = vmatprep.subr.bf16.mxu0 0
  %9249 = vmatpush1.bf16.msra.mxu0 0
  %9250 = vmatprep.subr.bf16.mxu0 0
  %9251 = vmatpush1.bf16.msra.mxu0 0
  %9252 = vmatprep.subr.bf16.mxu0 0
  %9253 = vmatpush1.bf16.msra.mxu0 0
  %9254 = vmatprep.subr.bf16.mxu0 0
  %9255 = vmatpush1.bf16.msra.mxu0 0
  %9256 = vmatprep.subr.bf16.mxu0 0
  %9257 = vmatpush1.bf16.msra.mxu0 0
  %9258 = vmatprep.subr.bf16.mxu0 0
  %9259 = vmatpush1.bf16.msra.mxu0 0
  %9260 = vmatprep.subr.bf16.mxu0 0
  %9261 = vmatpush1.bf16.msra.mxu0 0
  %9262 = vmatprep.subr.bf16.mxu0 0
  %9263 = vmatpush1.bf16.msra.mxu0 0
  %9264 = vmatprep.mubr.bf16.mxu0 0
  %9265 = vmatmul.mubr.bf16.gmra.mrb[0].mxu0 %v9165
  %v9266 = vpop.f32.mrb[0].mxu0
  %v9267 = vadd.f32 0.0, %v9266
  %v9268 = vpop.f32.mrb[0].mxu0
  %v9269 = vpop.f32.mrb[0].mxu0
  %v9270 = vadd.f32 0.0, %v9269
  %v9271 = vpop.f32.mrb[0].mxu0
  %9272 = vmatprep.mubr.bf16.mxu0 0
  %9273 = vmatmul.mubr.bf16.gmra.mrb[0].mxu0 %v9166
  %v9274 = vpop.f32.mrb[0].mxu0
  %v9275 = vadd.f32 0.0, %v9274
  %v9276 = vpop.f32.mrb[0].mxu0
  %v9277 = vpop.f32.mrb[0].mxu0
  %v9278 = vpop.f32.mrb[0].mxu0
  %9279 = vdwg.mxu0
  %v9296 = vunpack.c.l.b16 %v9083
  %v9297 = vunpack.c.l.b16 %v9084
  %v9298 = vunpack.c.l.b16 %v9085
  %v9299 = vunpack.c.l.b16 %v9086
  %v9300 = vunpack.c.l.b16 %v9087
  %v9301 = vunpack.c.l.b16 %v9088
  %v9302 = vunpack.c.l.b16 %v9089
  %v9303 = vunpack.c.l.b16 %v9090
  %v9304 = vunpack.c.l.b16 %v9091
  %v9305 = vunpack.c.l.b16 %v9092
  %v9306 = vunpack.c.l.b16 %v9093
  %v9307 = vunpack.c.l.b16 %v9094
  %v9308 = vunpack.c.l.b16 %v9095
  %v9309 = vunpack.c.l.b16 %v9096
  %v9310 = vunpack.c.l.b16 %v9097
  %v9311 = vunpack.c.l.b16 %v9098
  %v9312 = vpack.c.b16 %v9297, %v9296
  %v9313 = vpack.c.b16 %v9299, %v9298
  %v9314 = vpack.c.b16 %v9301, %v9300
  %v9315 = vpack.c.b16 %v9303, %v9302
  %v9316 = vpack.c.b16 %v9305, %v9304
  %v9317 = vpack.c.b16 %v9307, %v9306
  %v9318 = vpack.c.b16 %v9309, %v9308
  %v9319 = vpack.c.b16 %v9311, %v9310
  %9328 = vmatprep.subr.bf16.mxu0 0
  %9329 = vmatpush1.bf16.msra.mxu0 %v9312
  %9330 = vmatprep.subr.bf16.mxu0 0
  %9331 = vmatpush1.bf16.msra.mxu0 %v9313
  %9332 = vmatprep.subr.bf16.mxu0 0
  %9333 = vmatpush1.bf16.msra.mxu0 %v9314
  %9334 = vmatprep.subr.bf16.mxu0 0
  %9335 = vmatpush1.bf16.msra.mxu0 %v9315
  %9336 = vmatprep.subr.bf16.mxu0 0
  %9337 = vmatpush1.bf16.msra.mxu0 %v9316
  %9338 = vmatprep.subr.bf16.mxu0 0
  %9339 = vmatpush1.bf16.msra.mxu0 %v9317
  %9340 = vmatprep.subr.bf16.mxu0 0
  %9341 = vmatpush1.bf16.msra.mxu0 %v9318
  %9342 = vmatprep.subr.bf16.mxu0 0
  %9343 = vmatpush1.bf16.msra.mxu0 %v9319
  %9344 = vmatprep.subr.bf16.mxu0 0
  %9345 = vmatpush1.bf16.msra.mxu0 0
  %9346 = vmatprep.subr.bf16.mxu0 0
  %9347 = vmatpush1.bf16.msra.mxu0 0
  %9348 = vmatprep.subr.bf16.mxu0 0
  %9349 = vmatpush1.bf16.msra.mxu0 0
  %9350 = vmatprep.subr.bf16.mxu0 0
  %9351 = vmatpush1.bf16.msra.mxu0 0
  %9352 = vmatprep.subr.bf16.mxu0 0
  %9353 = vmatpush1.bf16.msra.mxu0 0
  %9354 = vmatprep.subr.bf16.mxu0 0
  %9355 = vmatpush1.bf16.msra.mxu0 0
  %9356 = vmatprep.subr.bf16.mxu0 0
  %9357 = vmatpush1.bf16.msra.mxu0 0
  %9358 = vmatprep.subr.bf16.mxu0 0
  %9359 = vmatpush1.bf16.msra.mxu0 0
  %9360 = vmatprep.mubr.bf16.mxu0 0
  %9361 = vmatmul.mubr.bf16.gmra.mrb[0].mxu0 %v9081
  %v9362 = vpop.f32.mrb[0].mxu0
  %v9363 = vadd.f32 %v9267, %v9362
  %v9364 = vpop.f32.mrb[0].mxu0
  %v9365 = vpop.f32.mrb[0].mxu0
  %v9366 = vadd.f32 %v9270, %v9365
  %v9367 = vpop.f32.mrb[0].mxu0
  %9368 = vmatprep.mubr.bf16.mxu0 0
  %9369 = vmatmul.mubr.bf16.gmra.mrb[0].mxu0 %v9082
  %v9370 = vpop.f32.mrb[0].mxu0
  %v9371 = vadd.f32 %v9275, %v9370
  %v9372 = vpop.f32.mrb[0].mxu0
  %v9373 = vpop.f32.mrb[0].mxu0
  %v9374 = vpop.f32.mrb[0].mxu0
  %9375 = vdwg.mxu0
  %s9376 = scalar_lea.vmem %s6, 24
  %v9377 = vld [vmem:[%s9376] sm:$0xf]
  %v9378 = vld [vmem:[%s9376 + $0x4] sm:$0xf]
  %v9379 = vld [vmem:[%s9376 + $0x8] sm:$0xf]
  %v9383 = vunpack.c.l.b16 %v9377
  %v9384 = vunpack.c.l.b16 %v9378
  %v9385 = vunpack.c.l.b16 %v9379
  %v9386 = vpack.c.b16 %v9384, %v9383
  %v9387 = vpack.c.b16 %v9385, %v9385
  %v9389 = vsel %vm9023, %v9386, 0
  %v9392 = vsel %vm9023, %v9387, 0
  %9394 = vmatprep.subr.bf16.mxu0 0
  %9395 = vmatpush1.bf16.msra.mxu0 %v9005
  %9396 = vmatprep.subr.bf16.mxu0 0
  %9397 = vmatpush1.bf16.msra.mxu0 %v9006
  %9398 = vmatprep.subr.bf16.mxu0 0
  %9399 = vmatpush1.bf16.msra.mxu0 %v9007
  %9400 = vmatprep.subr.bf16.mxu0 0
  %9401 = vmatpush1.bf16.msra.mxu0 %v9008
  %9402 = vmatprep.subr.bf16.mxu0 0
  %9403 = vmatpush1.bf16.msra.mxu0 %v9009
  %9404 = vmatprep.subr.bf16.mxu0 0
  %9405 = vmatpush1.bf16.msra.mxu0 %v9010
  %9406 = vmatprep.subr.bf16.mxu0 0
  %9407 = vmatpush1.bf16.msra.mxu0 %v9031
  %9408 = vmatprep.subr.bf16.mxu0 0
  %9409 = vmatpush1.bf16.msra.mxu0 0
  %9410 = vmatprep.subr.bf16.mxu0 0
  %9411 = vmatpush1.bf16.msra.mxu0 0
  %9412 = vmatprep.subr.bf16.mxu0 0
  %9413 = vmatpush1.bf16.msra.mxu0 0
  %9414 = vmatprep.subr.bf16.mxu0 0
  %9415 = vmatpush1.bf16.msra.mxu0 0
  %9416 = vmatprep.subr.bf16.mxu0 0
  %9417 = vmatpush1.bf16.msra.mxu0 0
  %9418 = vmatprep.subr.bf16.mxu0 0
  %9419 = vmatpush1.bf16.msra.mxu0 0
  %9420 = vmatprep.subr.bf16.mxu0 0
  %9421 = vmatpush1.bf16.msra.mxu0 0
  %9422 = vmatprep.subr.bf16.mxu0 0
  %9423 = vmatpush1.bf16.msra.mxu0 0
  %9424 = vmatprep.subr.bf16.mxu0 0
  %9425 = vmatpush1.bf16.msra.mxu0 0
  %9426 = vmatprep.mubr.bf16.mxu0 0
  %9427 = vmatmul.mubr.bf16.gmra.mrb[0].mxu0 %v9389
  %v9428 = vpop.f32.mrb[0].mxu0
  %v9429 = vadd.f32 0.0, %v9428
  %v9430 = vpop.f32.mrb[0].mxu0
  %v9431 = vpop.f32.mrb[0].mxu0
  %v9432 = vadd.f32 0.0, %v9431
  %v9433 = vpop.f32.mrb[0].mxu0
  %9434 = vmatprep.mubr.bf16.mxu0 0
  %9435 = vmatmul.mubr.bf16.gmra.mrb[0].mxu0 %v9392
  %v9436 = vpop.f32.mrb[0].mxu0
  %v9437 = vadd.f32 0.0, %v9436
  %v9438 = vpop.f32.mrb[0].mxu0
  %v9439 = vpop.f32.mrb[0].mxu0
  %v9440 = vpop.f32.mrb[0].mxu0
  %9441 = vdwg.mxu0
  %v9442 = vpack.c.bf16 %v9432, %v9429
  %v9443 = vpack.c.bf16 %v9437, %v9437
  %s9444 = scalar_lea.vmem %s7, 128
  %v9445 = vld [vmem:[%s9444] sm:$0xf]
  %v9446 = vld [vmem:[%s9444 + $0x4] sm:$0xf]
  %v9447 = vld [vmem:[%s9444 + $0x8] sm:$0xf]
  %v9448 = vld [vmem:[%s9444 + $0xc] sm:$0xf]
  %v9449 = vld [vmem:[%s9444 + $0x10] sm:$0xf]
  %v9450 = vld [vmem:[%s9444 + $0x14] sm:$0xf]
  %v9451 = vld [vmem:[%s9444 + $0x18] sm:$0xf]
  %v9452 = vld [vmem:[%s9444 + $0x1c] sm:$0xf]
  %v9453 = vld [vmem:[%s9444 + $0x20] sm:$0xf]
  %v9454 = vld [vmem:[%s9444 + $0x24] sm:$0xf]
  %v9455 = vld [vmem:[%s9444 + $0x28] sm:$0xf]
  %v9456 = vld [vmem:[%s9444 + $0x2c] sm:$0xf]
  %v9457 = vld [vmem:[%s9444 + $0x30] sm:$0xf]
  %v9458 = vld [vmem:[%s9444 + $0x34] sm:$0xf]
  %v9459 = vld [vmem:[%s9444 + $0x38] sm:$0xf]
  %v9460 = vld [vmem:[%s9444 + $0x3c] sm:$0xf]
  %v9477 = vunpack.c.l.b16 %v9445
  %v9478 = vunpack.c.l.b16 %v9446
  %v9479 = vunpack.c.l.b16 %v9447
  %v9480 = vunpack.c.l.b16 %v9448
  %v9481 = vunpack.c.l.b16 %v9449
  %v9482 = vunpack.c.l.b16 %v9450
  %v9483 = vunpack.c.l.b16 %v9451
  %v9484 = vunpack.c.l.b16 %v9452
  %v9485 = vunpack.c.l.b16 %v9453
  %v9486 = vunpack.c.l.b16 %v9454
  %v9487 = vunpack.c.l.b16 %v9455
  %v9488 = vunpack.c.l.b16 %v9456
  %v9489 = vunpack.c.l.b16 %v9457
  %v9490 = vunpack.c.l.b16 %v9458
  %v9491 = vunpack.c.l.b16 %v9459
  %v9492 = vunpack.c.l.b16 %v9460
  %v9493 = vpack.c.b16 %v9478, %v9477
  %v9494 = vpack.c.b16 %v9480, %v9479
  %v9495 = vpack.c.b16 %v9482, %v9481
  %v9496 = vpack.c.b16 %v9484, %v9483
  %v9497 = vpack.c.b16 %v9486, %v9485
  %v9498 = vpack.c.b16 %v9488, %v9487
  %v9499 = vpack.c.b16 %v9490, %v9489
  %v9500 = vpack.c.b16 %v9492, %v9491
  %9509 = vmatprep.subr.bf16.mxu0 0
  %9510 = vmatpush1.bf16.msra.mxu0 %v9493
  %9511 = vmatprep.subr.bf16.mxu0 0
  %9512 = vmatpush1.bf16.msra.mxu0 %v9494
  %9513 = vmatprep.subr.bf16.mxu0 0
  %9514 = vmatpush1.bf16.msra.mxu0 %v9495
  %9515 = vmatprep.subr.bf16.mxu0 0
  %9516 = vmatpush1.bf16.msra.mxu0 %v9496
  %9517 = vmatprep.subr.bf16.mxu0 0
  %9518 = vmatpush1.bf16.msra.mxu0 %v9497
  %9519 = vmatprep.subr.bf16.mxu0 0
  %9520 = vmatpush1.bf16.msra.mxu0 %v9498
  %9521 = vmatprep.subr.bf16.mxu0 0
  %9522 = vmatpush1.bf16.msra.mxu0 %v9499
  %9523 = vmatprep.subr.bf16.mxu0 0
  %9524 = vmatpush1.bf16.msra.mxu0 %v9500
  %9525 = vmatprep.subr.bf16.mxu0 0
  %9526 = vmatpush1.bf16.msra.mxu0 0
  %9527 = vmatprep.subr.bf16.mxu0 0
  %9528 = vmatpush1.bf16.msra.mxu0 0
  %9529 = vmatprep.subr.bf16.mxu0 0
  %9530 = vmatpush1.bf16.msra.mxu0 0
  %9531 = vmatprep.subr.bf16.mxu0 0
  %9532 = vmatpush1.bf16.msra.mxu0 0
  %9533 = vmatprep.subr.bf16.mxu0 0
  %9534 = vmatpush1.bf16.msra.mxu0 0
  %9535 = vmatprep.subr.bf16.mxu0 0
  %9536 = vmatpush1.bf16.msra.mxu0 0
  %9537 = vmatprep.subr.bf16.mxu0 0
  %9538 = vmatpush1.bf16.msra.mxu0 0
  %9539 = vmatprep.subr.bf16.mxu0 0
  %9540 = vmatpush1.bf16.msra.mxu0 0
  %9541 = vmatprep.mubr.bf16.mxu0 0
  %9542 = vmatmul.mubr.bf16.gmra.mrb[0].mxu0 %v9442
  %v9543 = vpop.f32.mrb[0].mxu0
  %v9544 = vadd.f32 0.0, %v9543
  %v9545 = vpop.f32.mrb[0].mxu0
  %v9546 = vpop.f32.mrb[0].mxu0
  %v9547 = vadd.f32 0.0, %v9546
  %v9548 = vpop.f32.mrb[0].mxu0
  %9549 = vmatprep.mubr.bf16.mxu0 0
  %9550 = vmatmul.mubr.bf16.gmra.mrb[0].mxu0 %v9443
  %v9551 = vpop.f32.mrb[0].mxu0
  %v9552 = vadd.f32 0.0, %v9551
  %v9553 = vpop.f32.mrb[0].mxu0
  %v9554 = vpop.f32.mrb[0].mxu0
  %v9555 = vpop.f32.mrb[0].mxu0
  %9556 = vdwg.mxu0
  %v9557 = vadd.f32 %v9363, %v9544
  %v9558 = vadd.f32 %v9366, %v9547
  %v9559 = vadd.f32 %v9371, %v9552
  %s9560 = scalar_lea.vmem %s6, 36
  %v9561 = vld [vmem:[%s9560] sm:$0xf]
  %v9562 = vld [vmem:[%s9560 + $0x4] sm:$0xf]
  %v9563 = vld [vmem:[%s9560 + $0x8] sm:$0xf]
  %v9567 = vunpack.c.l.b16 %v9561
  %v9568 = vunpack.c.l.b16 %v9562
  %v9569 = vunpack.c.l.b16 %v9563
  %v9570 = vpack.c.b16 %v9568, %v9567
  %v9571 = vpack.c.b16 %v9569, %v9569
  %v9573 = vsel %vm9023, %v9570, 0
  %v9576 = vsel %vm9023, %v9571, 0
  %9578 = vmatprep.subr.bf16.mxu0 0
  %9579 = vmatpush1.bf16.msra.mxu0 %v9005
  %9580 = vmatprep.subr.bf16.mxu0 0
  %9581 = vmatpush1.bf16.msra.mxu0 %v9006
  %9582 = vmatprep.subr.bf16.mxu0 0
  %9583 = vmatpush1.bf16.msra.mxu0 %v9007
  %9584 = vmatprep.subr.bf16.mxu0 0
  %9585 = vmatpush1.bf16.msra.mxu0 %v9008
  %9586 = vmatprep.subr.bf16.mxu0 0
  %9587 = vmatpush1.bf16.msra.mxu0 %v9009
  %9588 = vmatprep.subr.bf16.mxu0 0
  %9589 = vmatpush1.bf16.msra.mxu0 %v9010
  %9590 = vmatprep.subr.bf16.mxu0 0
  %9591 = vmatpush1.bf16.msra.mxu0 %v9031
  %9592 = vmatprep.subr.bf16.mxu0 0
  %9593 = vmatpush1.bf16.msra.mxu0 0
  %9594 = vmatprep.subr.bf16.mxu0 0
  %9595 = vmatpush1.bf16.msra.mxu0 0
  %9596 = vmatprep.subr.bf16.mxu0 0
  %9597 = vmatpush1.bf16.msra.mxu0 0
  %9598 = vmatprep.subr.bf16.mxu0 0
  %9599 = vmatpush1.bf16.msra.mxu0 0
  %9600 = vmatprep.subr.bf16.mxu0 0
  %9601 = vmatpush1.bf16.msra.mxu0 0
  %9602 = vmatprep.subr.bf16.mxu0 0
  %9603 = vmatpush1.bf16.msra.mxu0 0
  %9604 = vmatprep.subr.bf16.mxu0 0
  %9605 = vmatpush1.bf16.msra.mxu0 0
  %9606 = vmatprep.subr.bf16.mxu0 0
  %9607 = vmatpush1.bf16.msra.mxu0 0
  %9608 = vmatprep.subr.bf16.mxu0 0
  %9609 = vmatpush1.bf16.msra.mxu0 0
  %9610 = vmatprep.mubr.bf16.mxu0 0
  %9611 = vmatmul.mubr.bf16.gmra.mrb[0].mxu0 %v9573
  %v9612 = vpop.f32.mrb[0].mxu0
  %v9613 = vadd.f32 0.0, %v9612
  %v9614 = vpop.f32.mrb[0].mxu0
  %v9615 = vpop.f32.mrb[0].mxu0
  %v9616 = vadd.f32 0.0, %v9615
  %v9617 = vpop.f32.mrb[0].mxu0
  %9618 = vmatprep.mubr.bf16.mxu0 0
  %9619 = vmatmul.mubr.bf16.gmra.mrb[0].mxu0 %v9576
  %v9620 = vpop.f32.mrb[0].mxu0
  %v9621 = vadd.f32 0.0, %v9620
  %v9622 = vpop.f32.mrb[0].mxu0
  %v9623 = vpop.f32.mrb[0].mxu0
  %v9624 = vpop.f32.mrb[0].mxu0
  %9625 = vdwg.mxu0
  %v9626 = vpack.c.bf16 %v9616, %v9613
  %v9627 = vpack.c.bf16 %v9621, %v9621
  %s9628 = scalar_lea.vmem %s7, 192
  %v9629 = vld [vmem:[%s9628] sm:$0xf]
  %v9630 = vld [vmem:[%s9628 + $0x4] sm:$0xf]
  %v9631 = vld [vmem:[%s9628 + $0x8] sm:$0xf]
  %v9632 = vld [vmem:[%s9628 + $0xc] sm:$0xf]
  %v9633 = vld [vmem:[%s9628 + $0x10] sm:$0xf]
  %v9634 = vld [vmem:[%s9628 + $0x14] sm:$0xf]
  %v9635 = vld [vmem:[%s9628 + $0x18] sm:$0xf]
  %v9636 = vld [vmem:[%s9628 + $0x1c] sm:$0xf]
  %v9637 = vld [vmem:[%s9628 + $0x20] sm:$0xf]
  %v9638 = vld [vmem:[%s9628 + $0x24] sm:$0xf]
  %v9639 = vld [vmem:[%s9628 + $0x28] sm:$0xf]
  %v9640 = vld [vmem:[%s9628 + $0x2c] sm:$0xf]
  %v9641 = vld [vmem:[%s9628 + $0x30] sm:$0xf]
  %v9642 = vld [vmem:[%s9628 + $0x34] sm:$0xf]
  %v9643 = vld [vmem:[%s9628 + $0x38] sm:$0xf]
  %v9644 = vld [vmem:[%s9628 + $0x3c] sm:$0xf]
  %v9661 = vunpack.c.l.b16 %v9629
  %v9662 = vunpack.c.l.b16 %v9630
  %v9663 = vunpack.c.l.b16 %v9631
  %v9664 = vunpack.c.l.b16 %v9632
  %v9665 = vunpack.c.l.b16 %v9633
  %v9666 = vunpack.c.l.b16 %v9634
  %v9667 = vunpack.c.l.b16 %v9635
  %v9668 = vunpack.c.l.b16 %v9636
  %v9669 = vunpack.c.l.b16 %v9637
  %v9670 = vunpack.c.l.b16 %v9638
  %v9671 = vunpack.c.l.b16 %v9639
  %v9672 = vunpack.c.l.b16 %v9640
  %v9673 = vunpack.c.l.b16 %v9641
  %v9674 = vunpack.c.l.b16 %v9642
  %v9675 = vunpack.c.l.b16 %v9643
  %v9676 = vunpack.c.l.b16 %v9644
  %v9677 = vpack.c.b16 %v9662, %v9661
  %v9678 = vpack.c.b16 %v9664, %v9663
  %v9679 = vpack.c.b16 %v9666, %v9665
  %v9680 = vpack.c.b16 %v9668, %v9667
  %v9681 = vpack.c.b16 %v9670, %v9669
  %v9682 = vpack.c.b16 %v9672, %v9671
  %v9683 = vpack.c.b16 %v9674, %v9673
  %v9684 = vpack.c.b16 %v9676, %v9675
  %9693 = vmatprep.subr.bf16.mxu0 0
  %9694 = vmatpush1.bf16.msra.mxu0 %v9677
  %9695 = vmatprep.subr.bf16.mxu0 0
  %9696 = vmatpush1.bf16.msra.mxu0 %v9678
  %9697 = vmatprep.subr.bf16.mxu0 0
  %9698 = vmatpush1.bf16.msra.mxu0 %v9679
  %9699 = vmatprep.subr.bf16.mxu0 0
  %9700 = vmatpush1.bf16.msra.mxu0 %v9680
  %9701 = vmatprep.subr.bf16.mxu0 0
  %9702 = vmatpush1.bf16.msra.mxu0 %v9681
  %9703 = vmatprep.subr.bf16.mxu0 0
  %9704 = vmatpush1.bf16.msra.mxu0 %v9682
  %9705 = vmatprep.subr.bf16.mxu0 0
  %9706 = vmatpush1.bf16.msra.mxu0 %v9683
  %9707 = vmatprep.subr.bf16.mxu0 0
  %9708 = vmatpush1.bf16.msra.mxu0 %v9684
  %9709 = vmatprep.subr.bf16.mxu0 0
  %9710 = vmatpush1.bf16.msra.mxu0 0
  %9711 = vmatprep.subr.bf16.mxu0 0
  %9712 = vmatpush1.bf16.msra.mxu0 0
  %9713 = vmatprep.subr.bf16.mxu0 0
  %9714 = vmatpush1.bf16.msra.mxu0 0
  %9715 = vmatprep.subr.bf16.mxu0 0
  %9716 = vmatpush1.bf16.msra.mxu0 0
  %9717 = vmatprep.subr.bf16.mxu0 0
  %9718 = vmatpush1.bf16.msra.mxu0 0
  %9719 = vmatprep.subr.bf16.mxu0 0
  %9720 = vmatpush1.bf16.msra.mxu0 0
  %9721 = vmatprep.subr.bf16.mxu0 0
  %9722 = vmatpush1.bf16.msra.mxu0 0
  %9723 = vmatprep.subr.bf16.mxu0 0
  %9724 = vmatpush1.bf16.msra.mxu0 0
  %9725 = vmatprep.mubr.bf16.mxu0 0
  %9726 = vmatmul.mubr.bf16.gmra.mrb[0].mxu0 %v9626
  %v9727 = vpop.f32.mrb[0].mxu0
  %v9728 = vadd.f32 0.0, %v9727
  %v9729 = vpop.f32.mrb[0].mxu0
  %v9730 = vpop.f32.mrb[0].mxu0
  %v9731 = vadd.f32 0.0, %v9730
  %v9732 = vpop.f32.mrb[0].mxu0
  %9733 = vmatprep.mubr.bf16.mxu0 0
  %9734 = vmatmul.mubr.bf16.gmra.mrb[0].mxu0 %v9627
  %v9735 = vpop.f32.mrb[0].mxu0
  %v9736 = vadd.f32 0.0, %v9735
  %v9737 = vpop.f32.mrb[0].mxu0
  %v9738 = vpop.f32.mrb[0].mxu0
  %v9739 = vpop.f32.mrb[0].mxu0
  %9740 = vdwg.mxu0
  %v9741 = vadd.f32 %v9557, %v9728
  %v9742 = vadd.f32 %v9558, %v9731
  %v9743 = vadd.f32 %v9559, %v9736
  %s9744 = scalar_lea.vmem %s6, 48
  %v9745 = vld [vmem:[%s9744] sm:$0xf]
  %v9746 = vld [vmem:[%s9744 + $0x4] sm:$0xf]
  %v9747 = vld [vmem:[%s9744 + $0x8] sm:$0xf]
  %v9751 = vunpack.c.l.b16 %v9745
  %v9752 = vunpack.c.l.b16 %v9746
  %v9753 = vunpack.c.l.b16 %v9747
  %v9754 = vpack.c.b16 %v9752, %v9751
  %v9755 = vpack.c.b16 %v9753, %v9753
  %v9757 = vsel %vm9023, %v9754, 0
  %v9760 = vsel %vm9023, %v9755, 0
  %9762 = vmatprep.subr.bf16.mxu0 0
  %9763 = vmatpush1.bf16.msra.mxu0 %v9005
  %9764 = vmatprep.subr.bf16.mxu0 0
  %9765 = vmatpush1.bf16.msra.mxu0 %v9006
  %9766 = vmatprep.subr.bf16.mxu0 0
  %9767 = vmatpush1.bf16.msra.mxu0 %v9007
  %9768 = vmatprep.subr.bf16.mxu0 0
  %9769 = vmatpush1.bf16.msra.mxu0 %v9008
  %9770 = vmatprep.subr.bf16.mxu0 0
  %9771 = vmatpush1.bf16.msra.mxu0 %v9009
  %9772 = vmatprep.subr.bf16.mxu0 0
  %9773 = vmatpush1.bf16.msra.mxu0 %v9010
  %9774 = vmatprep.subr.bf16.mxu0 0
  %9775 = vmatpush1.bf16.msra.mxu0 %v9031
  %9776 = vmatprep.subr.bf16.mxu0 0
  %9777 = vmatpush1.bf16.msra.mxu0 0
  %9778 = vmatprep.subr.bf16.mxu0 0
  %9779 = vmatpush1.bf16.msra.mxu0 0
  %9780 = vmatprep.subr.bf16.mxu0 0
  %9781 = vmatpush1.bf16.msra.mxu0 0
  %9782 = vmatprep.subr.bf16.mxu0 0
  %9783 = vmatpush1.bf16.msra.mxu0 0
  %9784 = vmatprep.subr.bf16.mxu0 0
  %9785 = vmatpush1.bf16.msra.mxu0 0
  %9786 = vmatprep.subr.bf16.mxu0 0
  %9787 = vmatpush1.bf16.msra.mxu0 0
  %9788 = vmatprep.subr.bf16.mxu0 0
  %9789 = vmatpush1.bf16.msra.mxu0 0
  %9790 = vmatprep.subr.bf16.mxu0 0
  %9791 = vmatpush1.bf16.msra.mxu0 0
  %9792 = vmatprep.subr.bf16.mxu0 0
  %9793 = vmatpush1.bf16.msra.mxu0 0
  %9794 = vmatprep.mubr.bf16.mxu0 0
  %9795 = vmatmul.mubr.bf16.gmra.mrb[0].mxu0 %v9757
  %v9796 = vpop.f32.mrb[0].mxu0
  %v9797 = vadd.f32 0.0, %v9796
  %v9798 = vpop.f32.mrb[0].mxu0
  %v9799 = vpop.f32.mrb[0].mxu0
  %v9800 = vadd.f32 0.0, %v9799
  %v9801 = vpop.f32.mrb[0].mxu0
  %9802 = vmatprep.mubr.bf16.mxu0 0
  %9803 = vmatmul.mubr.bf16.gmra.mrb[0].mxu0 %v9760
  %v9804 = vpop.f32.mrb[0].mxu0
  %v9805 = vadd.f32 0.0, %v9804
  %v9806 = vpop.f32.mrb[0].mxu0
  %v9807 = vpop.f32.mrb[0].mxu0
  %v9808 = vpop.f32.mrb[0].mxu0
  %9809 = vdwg.mxu0
  %v9810 = vpack.c.bf16 %v9800, %v9797
  %v9811 = vpack.c.bf16 %v9805, %v9805
  %s9812 = scalar_lea.vmem %s7, 256
  %v9813 = vld [vmem:[%s9812] sm:$0xf]
  %v9814 = vld [vmem:[%s9812 + $0x4] sm:$0xf]
  %v9815 = vld [vmem:[%s9812 + $0x8] sm:$0xf]
  %v9816 = vld [vmem:[%s9812 + $0xc] sm:$0xf]
  %v9817 = vld [vmem:[%s9812 + $0x10] sm:$0xf]
  %v9818 = vld [vmem:[%s9812 + $0x14] sm:$0xf]
  %v9819 = vld [vmem:[%s9812 + $0x18] sm:$0xf]
  %v9820 = vld [vmem:[%s9812 + $0x1c] sm:$0xf]
  %v9821 = vld [vmem:[%s9812 + $0x20] sm:$0xf]
  %v9822 = vld [vmem:[%s9812 + $0x24] sm:$0xf]
  %v9823 = vld [vmem:[%s9812 + $0x28] sm:$0xf]
  %v9824 = vld [vmem:[%s9812 + $0x2c] sm:$0xf]
  %v9825 = vld [vmem:[%s9812 + $0x30] sm:$0xf]
  %v9826 = vld [vmem:[%s9812 + $0x34] sm:$0xf]
  %v9827 = vld [vmem:[%s9812 + $0x38] sm:$0xf]
  %v9828 = vld [vmem:[%s9812 + $0x3c] sm:$0xf]
  %v9845 = vunpack.c.l.b16 %v9813
  %v9846 = vunpack.c.l.b16 %v9814
  %v9847 = vunpack.c.l.b16 %v9815
  %v9848 = vunpack.c.l.b16 %v9816
  %v9849 = vunpack.c.l.b16 %v9817
  %v9850 = vunpack.c.l.b16 %v9818
  %v9851 = vunpack.c.l.b16 %v9819
  %v9852 = vunpack.c.l.b16 %v9820
  %v9853 = vunpack.c.l.b16 %v9821
  %v9854 = vunpack.c.l.b16 %v9822
  %v9855 = vunpack.c.l.b16 %v9823
  %v9856 = vunpack.c.l.b16 %v9824
  %v9857 = vunpack.c.l.b16 %v9825
  %v9858 = vunpack.c.l.b16 %v9826
  %v9859 = vunpack.c.l.b16 %v9827
  %v9860 = vunpack.c.l.b16 %v9828
  %v9861 = vpack.c.b16 %v9846, %v9845
  %v9862 = vpack.c.b16 %v9848, %v9847
  %v9863 = vpack.c.b16 %v9850, %v9849
  %v9864 = vpack.c.b16 %v9852, %v9851
  %v9865 = vpack.c.b16 %v9854, %v9853
  %v9866 = vpack.c.b16 %v9856, %v9855
  %v9867 = vpack.c.b16 %v9858, %v9857
  %v9868 = vpack.c.b16 %v9860, %v9859
  %9877 = vmatprep.subr.bf16.mxu0 0
  %9878 = vmatpush1.bf16.msra.mxu0 %v9861
  %9879 = vmatprep.subr.bf16.mxu0 0
  %9880 = vmatpush1.bf16.msra.mxu0 %v9862
  %9881 = vmatprep.subr.bf16.mxu0 0
  %9882 = vmatpush1.bf16.msra.mxu0 %v9863
  %9883 = vmatprep.subr.bf16.mxu0 0
  %9884 = vmatpush1.bf16.msra.mxu0 %v9864
  %9885 = vmatprep.subr.bf16.mxu0 0
  %9886 = vmatpush1.bf16.msra.mxu0 %v9865
  %9887 = vmatprep.subr.bf16.mxu0 0
  %9888 = vmatpush1.bf16.msra.mxu0 %v9866
  %9889 = vmatprep.subr.bf16.mxu0 0
  %9890 = vmatpush1.bf16.msra.mxu0 %v9867
  %9891 = vmatprep.subr.bf16.mxu0 0
  %9892 = vmatpush1.bf16.msra.mxu0 %v9868
  %9893 = vmatprep.subr.bf16.mxu0 0
  %9894 = vmatpush1.bf16.msra.mxu0 0
  %9895 = vmatprep.subr.bf16.mxu0 0
  %9896 = vmatpush1.bf16.msra.mxu0 0
  %9897 = vmatprep.subr.bf16.mxu0 0
  %9898 = vmatpush1.bf16.msra.mxu0 0
  %9899 = vmatprep.subr.bf16.mxu0 0
  %9900 = vmatpush1.bf16.msra.mxu0 0
  %9901 = vmatprep.subr.bf16.mxu0 0
  %9902 = vmatpush1.bf16.msra.mxu0 0
  %9903 = vmatprep.subr.bf16.mxu0 0
  %9904 = vmatpush1.bf16.msra.mxu0 0
  %9905 = vmatprep.subr.bf16.mxu0 0
  %9906 = vmatpush1.bf16.msra.mxu0 0
  %9907 = vmatprep.subr.bf16.mxu0 0
  %9908 = vmatpush1.bf16.msra.mxu0 0
  %9909 = vmatprep.mubr.bf16.mxu0 0
  %9910 = vmatmul.mubr.bf16.gmra.mrb[0].mxu0 %v9810
  %v9911 = vpop.f32.mrb[0].mxu0
  %v9912 = vadd.f32 0.0, %v9911
  %v9913 = vpop.f32.mrb[0].mxu0
  %v9914 = vpop.f32.mrb[0].mxu0
  %v9915 = vadd.f32 0.0, %v9914
  %v9916 = vpop.f32.mrb[0].mxu0
  %9917 = vmatprep.mubr.bf16.mxu0 0
  %9918 = vmatmul.mubr.bf16.gmra.mrb[0].mxu0 %v9811
  %v9919 = vpop.f32.mrb[0].mxu0
  %v9920 = vadd.f32 0.0, %v9919
  %v9921 = vpop.f32.mrb[0].mxu0
  %v9922 = vpop.f32.mrb[0].mxu0
  %v9923 = vpop.f32.mrb[0].mxu0
  %9924 = vdwg.mxu0
  %v9925 = vadd.f32 %v9741, %v9912
  %v9926 = vadd.f32 %v9742, %v9915
  %v9927 = vadd.f32 %v9743, %v9920
  %s9928 = scalar_lea.vmem %s6, 60
  %v9929 = vld [vmem:[%s9928] sm:$0xf]
  %v9930 = vld [vmem:[%s9928 + $0x4] sm:$0xf]
  %v9931 = vld [vmem:[%s9928 + $0x8] sm:$0xf]
  %v9935 = vunpack.c.l.b16 %v9929
  %v9936 = vunpack.c.l.b16 %v9930
  %v9937 = vunpack.c.l.b16 %v9931
  %v9938 = vpack.c.b16 %v9936, %v9935
  %v9939 = vpack.c.b16 %v9937, %v9937
  %v9941 = vsel %vm9023, %v9938, 0
  %v9944 = vsel %vm9023, %v9939, 0
  %9946 = vmatprep.subr.bf16.mxu0 0
  %9947 = vmatpush1.bf16.msra.mxu0 %v9005
  %9948 = vmatprep.subr.bf16.mxu0 0
  %9949 = vmatpush1.bf16.msra.mxu0 %v9006
  %9950 = vmatprep.subr.bf16.mxu0 0
  %9951 = vmatpush1.bf16.msra.mxu0 %v9007
  %9952 = vmatprep.subr.bf16.mxu0 0
  %9953 = vmatpush1.bf16.msra.mxu0 %v9008
  %9954 = vmatprep.subr.bf16.mxu0 0
  %9955 = vmatpush1.bf16.msra.mxu0 %v9009
  %9956 = vmatprep.subr.bf16.mxu0 0
  %9957 = vmatpush1.bf16.msra.mxu0 %v9010
  %9958 = vmatprep.subr.bf16.mxu0 0
  %9959 = vmatpush1.bf16.msra.mxu0 %v9031
  %9960 = vmatprep.subr.bf16.mxu0 0
  %9961 = vmatpush1.bf16.msra.mxu0 0
  %9962 = vmatprep.subr.bf16.mxu0 0
  %9963 = vmatpush1.bf16.msra.mxu0 0
  %9964 = vmatprep.subr.bf16.mxu0 0
  %9965 = vmatpush1.bf16.msra.mxu0 0
  %9966 = vmatprep.subr.bf16.mxu0 0
  %9967 = vmatpush1.bf16.msra.mxu0 0
  %9968 = vmatprep.subr.bf16.mxu0 0
  %9969 = vmatpush1.bf16.msra.mxu0 0
  %9970 = vmatprep.subr.bf16.mxu0 0
  %9971 = vmatpush1.bf16.msra.mxu0 0
  %9972 = vmatprep.subr.bf16.mxu0 0
  %9973 = vmatpush1.bf16.msra.mxu0 0
  %9974 = vmatprep.subr.bf16.mxu0 0
  %9975 = vmatpush1.bf16.msra.mxu0 0
  %9976 = vmatprep.subr.bf16.mxu0 0
  %9977 = vmatpush1.bf16.msra.mxu0 0
  %9978 = vmatprep.mubr.bf16.mxu0 0
  %9979 = vmatmul.mubr.bf16.gmra.mrb[0].mxu0 %v9941
  %v9980 = vpop.f32.mrb[0].mxu0
  %v9981 = vadd.f32 0.0, %v9980
  %v9982 = vpop.f32.mrb[0].mxu0
  %v9983 = vpop.f32.mrb[0].mxu0
  %v9984 = vadd.f32 0.0, %v9983
  %v9985 = vpop.f32.mrb[0].mxu0
  %9986 = vmatprep.mubr.bf16.mxu0 0
  %9987 = vmatmul.mubr.bf16.gmra.mrb[0].mxu0 %v9944
  %v9988 = vpop.f32.mrb[0].mxu0
  %v9989 = vadd.f32 0.0, %v9988
  %v9990 = vpop.f32.mrb[0].mxu0
  %v9991 = vpop.f32.mrb[0].mxu0
  %v9992 = vpop.f32.mrb[0].mxu0
  %9993 = vdwg.mxu0
  %v9994 = vpack.c.bf16 %v9984, %v9981
  %v9995 = vpack.c.bf16 %v9989, %v9989
  %s9996 = scalar_lea.vmem %s7, 320
  %v9997 = vld [vmem:[%s9996] sm:$0xf]
  %v9998 = vld [vmem:[%s9996 + $0x4] sm:$0xf]
  %v9999 = vld [vmem:[%s9996 + $0x8] sm:$0xf]
  %v10000 = vld [vmem:[%s9996 + $0xc] sm:$0xf]
  %v10001 = vld [vmem:[%s9996 + $0x10] sm:$0xf]
  %v10002 = vld [vmem:[%s9996 + $0x14] sm:$0xf]
  %v10003 = vld [vmem:[%s9996 + $0x18] sm:$0xf]
  %v10004 = vld [vmem:[%s9996 + $0x1c] sm:$0xf]
  %v10005 = vld [vmem:[%s9996 + $0x20] sm:$0xf]
  %v10006 = vld [vmem:[%s9996 + $0x24] sm:$0xf]
  %v10007 = vld [vmem:[%s9996 + $0x28] sm:$0xf]
  %v10008 = vld [vmem:[%s9996 + $0x2c] sm:$0xf]
  %v10009 = vld [vmem:[%s9996 + $0x30] sm:$0xf]
  %v10010 = vld [vmem:[%s9996 + $0x34] sm:$0xf]
  %v10011 = vld [vmem:[%s9996 + $0x38] sm:$0xf]
  %v10012 = vld [vmem:[%s9996 + $0x3c] sm:$0xf]
  %v10029 = vunpack.c.l.b16 %v9997
  %v10030 = vunpack.c.l.b16 %v9998
  %v10031 = vunpack.c.l.b16 %v9999
  %v10032 = vunpack.c.l.b16 %v10000
  %v10033 = vunpack.c.l.b16 %v10001
  %v10034 = vunpack.c.l.b16 %v10002
  %v10035 = vunpack.c.l.b16 %v10003
  %v10036 = vunpack.c.l.b16 %v10004
  %v10037 = vunpack.c.l.b16 %v10005
  %v10038 = vunpack.c.l.b16 %v10006
  %v10039 = vunpack.c.l.b16 %v10007
  %v10040 = vunpack.c.l.b16 %v10008
  %v10041 = vunpack.c.l.b16 %v10009
  %v10042 = vunpack.c.l.b16 %v10010
  %v10043 = vunpack.c.l.b16 %v10011
  %v10044 = vunpack.c.l.b16 %v10012
  %v10045 = vpack.c.b16 %v10030, %v10029
  %v10046 = vpack.c.b16 %v10032, %v10031
  %v10047 = vpack.c.b16 %v10034, %v10033
  %v10048 = vpack.c.b16 %v10036, %v10035
  %v10049 = vpack.c.b16 %v10038, %v10037
  %v10050 = vpack.c.b16 %v10040, %v10039
  %v10051 = vpack.c.b16 %v10042, %v10041
  %v10052 = vpack.c.b16 %v10044, %v10043
  %10061 = vmatprep.subr.bf16.mxu0 0
  %10062 = vmatpush1.bf16.msra.mxu0 %v10045
  %10063 = vmatprep.subr.bf16.mxu0 0
  %10064 = vmatpush1.bf16.msra.mxu0 %v10046
  %10065 = vmatprep.subr.bf16.mxu0 0
  %10066 = vmatpush1.bf16.msra.mxu0 %v10047
  %10067 = vmatprep.subr.bf16.mxu0 0
  %10068 = vmatpush1.bf16.msra.mxu0 %v10048
  %10069 = vmatprep.subr.bf16.mxu0 0
  %10070 = vmatpush1.bf16.msra.mxu0 %v10049
  %10071 = vmatprep.subr.bf16.mxu0 0
  %10072 = vmatpush1.bf16.msra.mxu0 %v10050
  %10073 = vmatprep.subr.bf16.mxu0 0
  %10074 = vmatpush1.bf16.msra.mxu0 %v10051
  %10075 = vmatprep.subr.bf16.mxu0 0
  %10076 = vmatpush1.bf16.msra.mxu0 %v10052
  %10077 = vmatprep.subr.bf16.mxu0 0
  %10078 = vmatpush1.bf16.msra.mxu0 0
  %10079 = vmatprep.subr.bf16.mxu0 0
  %10080 = vmatpush1.bf16.msra.mxu0 0
  %10081 = vmatprep.subr.bf16.mxu0 0
  %10082 = vmatpush1.bf16.msra.mxu0 0
  %10083 = vmatprep.subr.bf16.mxu0 0
  %10084 = vmatpush1.bf16.msra.mxu0 0
  %10085 = vmatprep.subr.bf16.mxu0 0
  %10086 = vmatpush1.bf16.msra.mxu0 0
  %10087 = vmatprep.subr.bf16.mxu0 0
  %10088 = vmatpush1.bf16.msra.mxu0 0
  %10089 = vmatprep.subr.bf16.mxu0 0
  %10090 = vmatpush1.bf16.msra.mxu0 0
  %10091 = vmatprep.subr.bf16.mxu0 0
  %10092 = vmatpush1.bf16.msra.mxu0 0
  %10093 = vmatprep.mubr.bf16.mxu0 0
  %10094 = vmatmul.mubr.bf16.gmra.mrb[0].mxu0 %v9994
  %v10095 = vpop.f32.mrb[0].mxu0
  %v10096 = vadd.f32 0.0, %v10095
  %v10097 = vpop.f32.mrb[0].mxu0
  %v10098 = vpop.f32.mrb[0].mxu0
  %v10099 = vadd.f32 0.0, %v10098
  %v10100 = vpop.f32.mrb[0].mxu0
  %10101 = vmatprep.mubr.bf16.mxu0 0
  %10102 = vmatmul.mubr.bf16.gmra.mrb[0].mxu0 %v9995
  %v10103 = vpop.f32.mrb[0].mxu0
  %v10104 = vadd.f32 0.0, %v10103
  %v10105 = vpop.f32.mrb[0].mxu0
  %v10106 = vpop.f32.mrb[0].mxu0
  %v10107 = vpop.f32.mrb[0].mxu0
  %10108 = vdwg.mxu0
  %v10109 = vadd.f32 %v9925, %v10096
  %v10110 = vadd.f32 %v9926, %v10099
  %v10111 = vadd.f32 %v9927, %v10104
  %s10112 = scalar_lea.vmem %s6, 72
  %v10113 = vld [vmem:[%s10112] sm:$0xf]
  %v10114 = vld [vmem:[%s10112 + $0x4] sm:$0xf]
  %v10115 = vld [vmem:[%s10112 + $0x8] sm:$0xf]
  %v10119 = vunpack.c.l.b16 %v10113
  %v10120 = vunpack.c.l.b16 %v10114
  %v10121 = vunpack.c.l.b16 %v10115
  %v10122 = vpack.c.b16 %v10120, %v10119
  %v10123 = vpack.c.b16 %v10121, %v10121
  %v10125 = vsel %vm9023, %v10122, 0
  %v10128 = vsel %vm9023, %v10123, 0
  %10130 = vmatprep.subr.bf16.mxu0 0
  %10131 = vmatpush1.bf16.msra.mxu0 %v9005
  %10132 = vmatprep.subr.bf16.mxu0 0
  %10133 = vmatpush1.bf16.msra.mxu0 %v9006
  %10134 = vmatprep.subr.bf16.mxu0 0
  %10135 = vmatpush1.bf16.msra.mxu0 %v9007
  %10136 = vmatprep.subr.bf16.mxu0 0
  %10137 = vmatpush1.bf16.msra.mxu0 %v9008
  %10138 = vmatprep.subr.bf16.mxu0 0
  %10139 = vmatpush1.bf16.msra.mxu0 %v9009
  %10140 = vmatprep.subr.bf16.mxu0 0
  %10141 = vmatpush1.bf16.msra.mxu0 %v9010
  %10142 = vmatprep.subr.bf16.mxu0 0
  %10143 = vmatpush1.bf16.msra.mxu0 %v9031
  %10144 = vmatprep.subr.bf16.mxu0 0
  %10145 = vmatpush1.bf16.msra.mxu0 0
  %10146 = vmatprep.subr.bf16.mxu0 0
  %10147 = vmatpush1.bf16.msra.mxu0 0
  %10148 = vmatprep.subr.bf16.mxu0 0
  %10149 = vmatpush1.bf16.msra.mxu0 0
  %10150 = vmatprep.subr.bf16.mxu0 0
  %10151 = vmatpush1.bf16.msra.mxu0 0
  %10152 = vmatprep.subr.bf16.mxu0 0
  %10153 = vmatpush1.bf16.msra.mxu0 0
  %10154 = vmatprep.subr.bf16.mxu0 0
  %10155 = vmatpush1.bf16.msra.mxu0 0
  %10156 = vmatprep.subr.bf16.mxu0 0
  %10157 = vmatpush1.bf16.msra.mxu0 0
  %10158 = vmatprep.subr.bf16.mxu0 0
  %10159 = vmatpush1.bf16.msra.mxu0 0
  %10160 = vmatprep.subr.bf16.mxu0 0
  %10161 = vmatpush1.bf16.msra.mxu0 0
  %10162 = vmatprep.mubr.bf16.mxu0 0
  %10163 = vmatmul.mubr.bf16.gmra.mrb[0].mxu0 %v10125
  %v10164 = vpop.f32.mrb[0].mxu0
  %v10165 = vadd.f32 0.0, %v10164
  %v10166 = vpop.f32.mrb[0].mxu0
  %v10167 = vpop.f32.mrb[0].mxu0
  %v10168 = vadd.f32 0.0, %v10167
  %v10169 = vpop.f32.mrb[0].mxu0
  %10170 = vmatprep.mubr.bf16.mxu0 0
  %10171 = vmatmul.mubr.bf16.gmra.mrb[0].mxu0 %v10128
  %v10172 = vpop.f32.mrb[0].mxu0
  %v10173 = vadd.f32 0.0, %v10172
  %v10174 = vpop.f32.mrb[0].mxu0
  %v10175 = vpop.f32.mrb[0].mxu0
  %v10176 = vpop.f32.mrb[0].mxu0
  %10177 = vdwg.mxu0
  %v10178 = vpack.c.bf16 %v10168, %v10165
  %v10179 = vpack.c.bf16 %v10173, %v10173
  %s10180 = scalar_lea.vmem %s7, 384
  %v10181 = vld [vmem:[%s10180] sm:$0xf]
  %v10182 = vld [vmem:[%s10180 + $0x4] sm:$0xf]
  %v10183 = vld [vmem:[%s10180 + $0x8] sm:$0xf]
  %v10184 = vld [vmem:[%s10180 + $0xc] sm:$0xf]
  %v10185 = vld [vmem:[%s10180 + $0x10] sm:$0xf]
  %v10186 = vld [vmem:[%s10180 + $0x14] sm:$0xf]
  %v10187 = vld [vmem:[%s10180 + $0x18] sm:$0xf]
  %v10188 = vld [vmem:[%s10180 + $0x1c] sm:$0xf]
  %v10189 = vld [vmem:[%s10180 + $0x20] sm:$0xf]
  %v10190 = vld [vmem:[%s10180 + $0x24] sm:$0xf]
  %v10191 = vld [vmem:[%s10180 + $0x28] sm:$0xf]
  %v10192 = vld [vmem:[%s10180 + $0x2c] sm:$0xf]
  %v10193 = vld [vmem:[%s10180 + $0x30] sm:$0xf]
  %v10194 = vld [vmem:[%s10180 + $0x34] sm:$0xf]
  %v10195 = vld [vmem:[%s10180 + $0x38] sm:$0xf]
  %v10196 = vld [vmem:[%s10180 + $0x3c] sm:$0xf]
  %v10213 = vunpack.c.l.b16 %v10181
  %v10214 = vunpack.c.l.b16 %v10182
  %v10215 = vunpack.c.l.b16 %v10183
  %v10216 = vunpack.c.l.b16 %v10184
  %v10217 = vunpack.c.l.b16 %v10185
  %v10218 = vunpack.c.l.b16 %v10186
  %v10219 = vunpack.c.l.b16 %v10187
  %v10220 = vunpack.c.l.b16 %v10188
  %v10221 = vunpack.c.l.b16 %v10189
  %v10222 = vunpack.c.l.b16 %v10190
  %v10223 = vunpack.c.l.b16 %v10191
  %v10224 = vunpack.c.l.b16 %v10192
  %v10225 = vunpack.c.l.b16 %v10193
  %v10226 = vunpack.c.l.b16 %v10194
  %v10227 = vunpack.c.l.b16 %v10195
  %v10228 = vunpack.c.l.b16 %v10196
  %v10229 = vpack.c.b16 %v10214, %v10213
  %v10230 = vpack.c.b16 %v10216, %v10215
  %v10231 = vpack.c.b16 %v10218, %v10217
  %v10232 = vpack.c.b16 %v10220, %v10219
  %v10233 = vpack.c.b16 %v10222, %v10221
  %v10234 = vpack.c.b16 %v10224, %v10223
  %v10235 = vpack.c.b16 %v10226, %v10225
  %v10236 = vpack.c.b16 %v10228, %v10227
  %10245 = vmatprep.subr.bf16.mxu0 0
  %10246 = vmatpush1.bf16.msra.mxu0 %v10229
  %10247 = vmatprep.subr.bf16.mxu0 0
  %10248 = vmatpush1.bf16.msra.mxu0 %v10230
  %10249 = vmatprep.subr.bf16.mxu0 0
  %10250 = vmatpush1.bf16.msra.mxu0 %v10231
  %10251 = vmatprep.subr.bf16.mxu0 0
  %10252 = vmatpush1.bf16.msra.mxu0 %v10232
  %10253 = vmatprep.subr.bf16.mxu0 0
  %10254 = vmatpush1.bf16.msra.mxu0 %v10233
  %10255 = vmatprep.subr.bf16.mxu0 0
  %10256 = vmatpush1.bf16.msra.mxu0 %v10234
  %10257 = vmatprep.subr.bf16.mxu0 0
  %10258 = vmatpush1.bf16.msra.mxu0 %v10235
  %10259 = vmatprep.subr.bf16.mxu0 0
  %10260 = vmatpush1.bf16.msra.mxu0 %v10236
  %10261 = vmatprep.subr.bf16.mxu0 0
  %10262 = vmatpush1.bf16.msra.mxu0 0
  %10263 = vmatprep.subr.bf16.mxu0 0
  %10264 = vmatpush1.bf16.msra.mxu0 0
  %10265 = vmatprep.subr.bf16.mxu0 0
  %10266 = vmatpush1.bf16.msra.mxu0 0
  %10267 = vmatprep.subr.bf16.mxu0 0
  %10268 = vmatpush1.bf16.msra.mxu0 0
  %10269 = vmatprep.subr.bf16.mxu0 0
  %10270 = vmatpush1.bf16.msra.mxu0 0
  %10271 = vmatprep.subr.bf16.mxu0 0
  %10272 = vmatpush1.bf16.msra.mxu0 0
  %10273 = vmatprep.subr.bf16.mxu0 0
  %10274 = vmatpush1.bf16.msra.mxu0 0
  %10275 = vmatprep.subr.bf16.mxu0 0
  %10276 = vmatpush1.bf16.msra.mxu0 0
  %10277 = vmatprep.mubr.bf16.mxu0 0
  %10278 = vmatmul.mubr.bf16.gmra.mrb[0].mxu0 %v10178
  %v10279 = vpop.f32.mrb[0].mxu0
  %v10280 = vadd.f32 0.0, %v10279
  %v10281 = vpop.f32.mrb[0].mxu0
  %v10282 = vpop.f32.mrb[0].mxu0
  %v10283 = vadd.f32 0.0, %v10282
  %v10284 = vpop.f32.mrb[0].mxu0
  %10285 = vmatprep.mubr.bf16.mxu0 0
  %10286 = vmatmul.mubr.bf16.gmra.mrb[0].mxu0 %v10179
  %v10287 = vpop.f32.mrb[0].mxu0
  %v10288 = vadd.f32 0.0, %v10287
  %v10289 = vpop.f32.mrb[0].mxu0
  %v10290 = vpop.f32.mrb[0].mxu0
  %v10291 = vpop.f32.mrb[0].mxu0
  %10292 = vdwg.mxu0
  %v10293 = vadd.f32 %v10109, %v10280
  %v10294 = vadd.f32 %v10110, %v10283
  %v10295 = vadd.f32 %v10111, %v10288
  %s10296 = scalar_lea.vmem %s6, 84
  %v10297 = vld [vmem:[%s10296] sm:$0xf]
  %v10298 = vld [vmem:[%s10296 + $0x4] sm:$0xf]
  %v10299 = vld [vmem:[%s10296 + $0x8] sm:$0xf]
  %v10303 = vunpack.c.l.b16 %v10297
  %v10304 = vunpack.c.l.b16 %v10298
  %v10305 = vunpack.c.l.b16 %v10299
  %v10306 = vpack.c.b16 %v10304, %v10303
  %v10307 = vpack.c.b16 %v10305, %v10305
  %v10309 = vsel %vm9023, %v10306, 0
  %v10312 = vsel %vm9023, %v10307, 0
  %10314 = vmatprep.subr.bf16.mxu0 0
  %10315 = vmatpush1.bf16.msra.mxu0 %v9005
  %10316 = vmatprep.subr.bf16.mxu0 0
  %10317 = vmatpush1.bf16.msra.mxu0 %v9006
  %10318 = vmatprep.subr.bf16.mxu0 0
  %10319 = vmatpush1.bf16.msra.mxu0 %v9007
  %10320 = vmatprep.subr.bf16.mxu0 0
  %10321 = vmatpush1.bf16.msra.mxu0 %v9008
  %10322 = vmatprep.subr.bf16.mxu0 0
  %10323 = vmatpush1.bf16.msra.mxu0 %v9009
  %10324 = vmatprep.subr.bf16.mxu0 0
  %10325 = vmatpush1.bf16.msra.mxu0 %v9010
  %10326 = vmatprep.subr.bf16.mxu0 0
  %10327 = vmatpush1.bf16.msra.mxu0 %v9031
  %10328 = vmatprep.subr.bf16.mxu0 0
  %10329 = vmatpush1.bf16.msra.mxu0 0
  %10330 = vmatprep.subr.bf16.mxu0 0
  %10331 = vmatpush1.bf16.msra.mxu0 0
  %10332 = vmatprep.subr.bf16.mxu0 0
  %10333 = vmatpush1.bf16.msra.mxu0 0
  %10334 = vmatprep.subr.bf16.mxu0 0
  %10335 = vmatpush1.bf16.msra.mxu0 0
  %10336 = vmatprep.subr.bf16.mxu0 0
  %10337 = vmatpush1.bf16.msra.mxu0 0
  %10338 = vmatprep.subr.bf16.mxu0 0
  %10339 = vmatpush1.bf16.msra.mxu0 0
  %10340 = vmatprep.subr.bf16.mxu0 0
  %10341 = vmatpush1.bf16.msra.mxu0 0
  %10342 = vmatprep.subr.bf16.mxu0 0
  %10343 = vmatpush1.bf16.msra.mxu0 0
  %10344 = vmatprep.subr.bf16.mxu0 0
  %10345 = vmatpush1.bf16.msra.mxu0 0
  %10346 = vmatprep.mubr.bf16.mxu0 0
  %10347 = vmatmul.mubr.bf16.gmra.mrb[0].mxu0 %v10309
  %v10348 = vpop.f32.mrb[0].mxu0
  %v10349 = vadd.f32 0.0, %v10348
  %v10350 = vpop.f32.mrb[0].mxu0
  %v10351 = vpop.f32.mrb[0].mxu0
  %v10352 = vadd.f32 0.0, %v10351
  %v10353 = vpop.f32.mrb[0].mxu0
  %10354 = vmatprep.mubr.bf16.mxu0 0
  %10355 = vmatmul.mubr.bf16.gmra.mrb[0].mxu0 %v10312
  %v10356 = vpop.f32.mrb[0].mxu0
  %v10357 = vadd.f32 0.0, %v10356
  %v10358 = vpop.f32.mrb[0].mxu0
  %v10359 = vpop.f32.mrb[0].mxu0
  %v10360 = vpop.f32.mrb[0].mxu0
  %10361 = vdwg.mxu0
  %v10362 = vpack.c.bf16 %v10352, %v10349
  %v10363 = vpack.c.bf16 %v10357, %v10357
  %s10364 = scalar_lea.vmem %s7, 448
  %v10365 = vld [vmem:[%s10364] sm:$0xf]
  %v10366 = vld [vmem:[%s10364 + $0x4] sm:$0xf]
  %v10367 = vld [vmem:[%s10364 + $0x8] sm:$0xf]
  %v10368 = vld [vmem:[%s10364 + $0xc] sm:$0xf]
  %v10369 = vld [vmem:[%s10364 + $0x10] sm:$0xf]
  %v10370 = vld [vmem:[%s10364 + $0x14] sm:$0xf]
  %v10371 = vld [vmem:[%s10364 + $0x18] sm:$0xf]
  %v10372 = vld [vmem:[%s10364 + $0x1c] sm:$0xf]
  %v10373 = vld [vmem:[%s10364 + $0x20] sm:$0xf]
  %v10374 = vld [vmem:[%s10364 + $0x24] sm:$0xf]
  %v10375 = vld [vmem:[%s10364 + $0x28] sm:$0xf]
  %v10376 = vld [vmem:[%s10364 + $0x2c] sm:$0xf]
  %v10377 = vld [vmem:[%s10364 + $0x30] sm:$0xf]
  %v10378 = vld [vmem:[%s10364 + $0x34] sm:$0xf]
  %v10379 = vld [vmem:[%s10364 + $0x38] sm:$0xf]
  %v10380 = vld [vmem:[%s10364 + $0x3c] sm:$0xf]
  %v10397 = vunpack.c.l.b16 %v10365
  %v10398 = vunpack.c.l.b16 %v10366
  %v10399 = vunpack.c.l.b16 %v10367
  %v10400 = vunpack.c.l.b16 %v10368
  %v10401 = vunpack.c.l.b16 %v10369
  %v10402 = vunpack.c.l.b16 %v10370
  %v10403 = vunpack.c.l.b16 %v10371
  %v10404 = vunpack.c.l.b16 %v10372
  %v10405 = vunpack.c.l.b16 %v10373
  %v10406 = vunpack.c.l.b16 %v10374
  %v10407 = vunpack.c.l.b16 %v10375
  %v10408 = vunpack.c.l.b16 %v10376
  %v10409 = vunpack.c.l.b16 %v10377
  %v10410 = vunpack.c.l.b16 %v10378
  %v10411 = vunpack.c.l.b16 %v10379
  %v10412 = vunpack.c.l.b16 %v10380
  %v10413 = vpack.c.b16 %v10398, %v10397
  %v10414 = vpack.c.b16 %v10400, %v10399
  %v10415 = vpack.c.b16 %v10402, %v10401
  %v10416 = vpack.c.b16 %v10404, %v10403
  %v10417 = vpack.c.b16 %v10406, %v10405
  %v10418 = vpack.c.b16 %v10408, %v10407
  %v10419 = vpack.c.b16 %v10410, %v10409
  %v10420 = vpack.c.b16 %v10412, %v10411
  %10429 = vmatprep.subr.bf16.mxu0 0
  %10430 = vmatpush1.bf16.msra.mxu0 %v10413
  %10431 = vmatprep.subr.bf16.mxu0 0
  %10432 = vmatpush1.bf16.msra.mxu0 %v10414
  %10433 = vmatprep.subr.bf16.mxu0 0
  %10434 = vmatpush1.bf16.msra.mxu0 %v10415
  %10435 = vmatprep.subr.bf16.mxu0 0
  %10436 = vmatpush1.bf16.msra.mxu0 %v10416
  %10437 = vmatprep.subr.bf16.mxu0 0
  %10438 = vmatpush1.bf16.msra.mxu0 %v10417
  %10439 = vmatprep.subr.bf16.mxu0 0
  %10440 = vmatpush1.bf16.msra.mxu0 %v10418
  %10441 = vmatprep.subr.bf16.mxu0 0
  %10442 = vmatpush1.bf16.msra.mxu0 %v10419
  %10443 = vmatprep.subr.bf16.mxu0 0
  %10444 = vmatpush1.bf16.msra.mxu0 %v10420
  %10445 = vmatprep.subr.bf16.mxu0 0
  %10446 = vmatpush1.bf16.msra.mxu0 0
  %10447 = vmatprep.subr.bf16.mxu0 0
  %10448 = vmatpush1.bf16.msra.mxu0 0
  %10449 = vmatprep.subr.bf16.mxu0 0
  %10450 = vmatpush1.bf16.msra.mxu0 0
  %10451 = vmatprep.subr.bf16.mxu0 0
  %10452 = vmatpush1.bf16.msra.mxu0 0
  %10453 = vmatprep.subr.bf16.mxu0 0
  %10454 = vmatpush1.bf16.msra.mxu0 0
  %10455 = vmatprep.subr.bf16.mxu0 0
  %10456 = vmatpush1.bf16.msra.mxu0 0
  %10457 = vmatprep.subr.bf16.mxu0 0
  %10458 = vmatpush1.bf16.msra.mxu0 0
  %10459 = vmatprep.subr.bf16.mxu0 0
  %10460 = vmatpush1.bf16.msra.mxu0 0
  %10461 = vmatprep.mubr.bf16.mxu0 0
  %10462 = vmatmul.mubr.bf16.gmra.mrb[0].mxu0 %v10362
  %v10463 = vpop.f32.mrb[0].mxu0
  %v10464 = vadd.f32 0.0, %v10463
  %v10465 = vpop.f32.mrb[0].mxu0
  %v10466 = vpop.f32.mrb[0].mxu0
  %v10467 = vadd.f32 0.0, %v10466
  %v10468 = vpop.f32.mrb[0].mxu0
  %10469 = vmatprep.mubr.bf16.mxu0 0
  %10470 = vmatmul.mubr.bf16.gmra.mrb[0].mxu0 %v10363
  %v10471 = vpop.f32.mrb[0].mxu0
  %v10472 = vadd.f32 0.0, %v10471
  %v10473 = vpop.f32.mrb[0].mxu0
  %v10474 = vpop.f32.mrb[0].mxu0
  %v10475 = vpop.f32.mrb[0].mxu0
  %10476 = vdwg.mxu0
  %v10477 = vadd.f32 %v10293, %v10464
  %v10478 = vadd.f32 %v10294, %v10467
  %v10479 = vadd.f32 %v10295, %v10472
  %s10480 = scalar_lea.vmem %s6, 96
  %v10481 = vld [vmem:[%s10480] sm:$0xf]
  %v10482 = vld [vmem:[%s10480 + $0x4] sm:$0xf]
  %v10483 = vld [vmem:[%s10480 + $0x8] sm:$0xf]
  %v10487 = vunpack.c.l.b16 %v10481
  %v10488 = vunpack.c.l.b16 %v10482
  %v10489 = vunpack.c.l.b16 %v10483
  %v10490 = vpack.c.b16 %v10488, %v10487
  %v10491 = vpack.c.b16 %v10489, %v10489
  %v10493 = vsel %vm9023, %v10490, 0
  %v10496 = vsel %vm9023, %v10491, 0
  %10498 = vmatprep.subr.bf16.mxu0 0
  %10499 = vmatpush1.bf16.msra.mxu0 %v9005
  %10500 = vmatprep.subr.bf16.mxu0 0
  %10501 = vmatpush1.bf16.msra.mxu0 %v9006
  %10502 = vmatprep.subr.bf16.mxu0 0
  %10503 = vmatpush1.bf16.msra.mxu0 %v9007
  %10504 = vmatprep.subr.bf16.mxu0 0
  %10505 = vmatpush1.bf16.msra.mxu0 %v9008
  %10506 = vmatprep.subr.bf16.mxu0 0
  %10507 = vmatpush1.bf16.msra.mxu0 %v9009
  %10508 = vmatprep.subr.bf16.mxu0 0
  %10509 = vmatpush1.bf16.msra.mxu0 %v9010
  %10510 = vmatprep.subr.bf16.mxu0 0
  %10511 = vmatpush1.bf16.msra.mxu0 %v9031
  %10512 = vmatprep.subr.bf16.mxu0 0
  %10513 = vmatpush1.bf16.msra.mxu0 0
  %10514 = vmatprep.subr.bf16.mxu0 0
  %10515 = vmatpush1.bf16.msra.mxu0 0
  %10516 = vmatprep.subr.bf16.mxu0 0
  %10517 = vmatpush1.bf16.msra.mxu0 0
  %10518 = vmatprep.subr.bf16.mxu0 0
  %10519 = vmatpush1.bf16.msra.mxu0 0
  %10520 = vmatprep.subr.bf16.mxu0 0
  %10521 = vmatpush1.bf16.msra.mxu0 0
  %10522 = vmatprep.subr.bf16.mxu0 0
  %10523 = vmatpush1.bf16.msra.mxu0 0
  %10524 = vmatprep.subr.bf16.mxu0 0
  %10525 = vmatpush1.bf16.msra.mxu0 0
  %10526 = vmatprep.subr.bf16.mxu0 0
  %10527 = vmatpush1.bf16.msra.mxu0 0
  %10528 = vmatprep.subr.bf16.mxu0 0
  %10529 = vmatpush1.bf16.msra.mxu0 0
  %10530 = vmatprep.mubr.bf16.mxu0 0
  %10531 = vmatmul.mubr.bf16.gmra.mrb[0].mxu0 %v10493
  %v10532 = vpop.f32.mrb[0].mxu0
  %v10533 = vadd.f32 0.0, %v10532
  %v10534 = vpop.f32.mrb[0].mxu0
  %v10535 = vpop.f32.mrb[0].mxu0
  %v10536 = vadd.f32 0.0, %v10535
  %v10537 = vpop.f32.mrb[0].mxu0
  %10538 = vmatprep.mubr.bf16.mxu0 0
  %10539 = vmatmul.mubr.bf16.gmra.mrb[0].mxu0 %v10496
  %v10540 = vpop.f32.mrb[0].mxu0
  %v10541 = vadd.f32 0.0, %v10540
  %v10542 = vpop.f32.mrb[0].mxu0
  %v10543 = vpop.f32.mrb[0].mxu0
  %v10544 = vpop.f32.mrb[0].mxu0
  %10545 = vdwg.mxu0
  %v10546 = vpack.c.bf16 %v10536, %v10533
  %v10547 = vpack.c.bf16 %v10541, %v10541
  %s10548 = scalar_lea.vmem %s7, 512
  %v10549 = vld [vmem:[%s10548] sm:$0xf]
  %v10550 = vld [vmem:[%s10548 + $0x4] sm:$0xf]
  %v10551 = vld [vmem:[%s10548 + $0x8] sm:$0xf]
  %v10552 = vld [vmem:[%s10548 + $0xc] sm:$0xf]
  %v10553 = vld [vmem:[%s10548 + $0x10] sm:$0xf]
  %v10554 = vld [vmem:[%s10548 + $0x14] sm:$0xf]
  %v10555 = vld [vmem:[%s10548 + $0x18] sm:$0xf]
  %v10556 = vld [vmem:[%s10548 + $0x1c] sm:$0xf]
  %v10557 = vld [vmem:[%s10548 + $0x20] sm:$0xf]
  %v10558 = vld [vmem:[%s10548 + $0x24] sm:$0xf]
  %v10559 = vld [vmem:[%s10548 + $0x28] sm:$0xf]
  %v10560 = vld [vmem:[%s10548 + $0x2c] sm:$0xf]
  %v10561 = vld [vmem:[%s10548 + $0x30] sm:$0xf]
  %v10562 = vld [vmem:[%s10548 + $0x34] sm:$0xf]
  %v10563 = vld [vmem:[%s10548 + $0x38] sm:$0xf]
  %v10564 = vld [vmem:[%s10548 + $0x3c] sm:$0xf]
  %v10581 = vunpack.c.l.b16 %v10549
  %v10582 = vunpack.c.l.b16 %v10550
  %v10583 = vunpack.c.l.b16 %v10551
  %v10584 = vunpack.c.l.b16 %v10552
  %v10585 = vunpack.c.l.b16 %v10553
  %v10586 = vunpack.c.l.b16 %v10554
  %v10587 = vunpack.c.l.b16 %v10555
  %v10588 = vunpack.c.l.b16 %v10556
  %v10589 = vunpack.c.l.b16 %v10557
  %v10590 = vunpack.c.l.b16 %v10558
  %v10591 = vunpack.c.l.b16 %v10559
  %v10592 = vunpack.c.l.b16 %v10560
  %v10593 = vunpack.c.l.b16 %v10561
  %v10594 = vunpack.c.l.b16 %v10562
  %v10595 = vunpack.c.l.b16 %v10563
  %v10596 = vunpack.c.l.b16 %v10564
  %v10597 = vpack.c.b16 %v10582, %v10581
  %v10598 = vpack.c.b16 %v10584, %v10583
  %v10599 = vpack.c.b16 %v10586, %v10585
  %v10600 = vpack.c.b16 %v10588, %v10587
  %v10601 = vpack.c.b16 %v10590, %v10589
  %v10602 = vpack.c.b16 %v10592, %v10591
  %v10603 = vpack.c.b16 %v10594, %v10593
  %v10604 = vpack.c.b16 %v10596, %v10595
  %10613 = vmatprep.subr.bf16.mxu0 0
  %10614 = vmatpush1.bf16.msra.mxu0 %v10597
  %10615 = vmatprep.subr.bf16.mxu0 0
  %10616 = vmatpush1.bf16.msra.mxu0 %v10598
  %10617 = vmatprep.subr.bf16.mxu0 0
  %10618 = vmatpush1.bf16.msra.mxu0 %v10599
  %10619 = vmatprep.subr.bf16.mxu0 0
  %10620 = vmatpush1.bf16.msra.mxu0 %v10600
  %10621 = vmatprep.subr.bf16.mxu0 0
  %10622 = vmatpush1.bf16.msra.mxu0 %v10601
  %10623 = vmatprep.subr.bf16.mxu0 0
  %10624 = vmatpush1.bf16.msra.mxu0 %v10602
  %10625 = vmatprep.subr.bf16.mxu0 0
  %10626 = vmatpush1.bf16.msra.mxu0 %v10603
  %10627 = vmatprep.subr.bf16.mxu0 0
  %10628 = vmatpush1.bf16.msra.mxu0 %v10604
  %10629 = vmatprep.subr.bf16.mxu0 0
  %10630 = vmatpush1.bf16.msra.mxu0 0
  %10631 = vmatprep.subr.bf16.mxu0 0
  %10632 = vmatpush1.bf16.msra.mxu0 0
  %10633 = vmatprep.subr.bf16.mxu0 0
  %10634 = vmatpush1.bf16.msra.mxu0 0
  %10635 = vmatprep.subr.bf16.mxu0 0
  %10636 = vmatpush1.bf16.msra.mxu0 0
  %10637 = vmatprep.subr.bf16.mxu0 0
  %10638 = vmatpush1.bf16.msra.mxu0 0
  %10639 = vmatprep.subr.bf16.mxu0 0
  %10640 = vmatpush1.bf16.msra.mxu0 0
  %10641 = vmatprep.subr.bf16.mxu0 0
  %10642 = vmatpush1.bf16.msra.mxu0 0
  %10643 = vmatprep.subr.bf16.mxu0 0
  %10644 = vmatpush1.bf16.msra.mxu0 0
  %10645 = vmatprep.mubr.bf16.mxu0 0
  %10646 = vmatmul.mubr.bf16.gmra.mrb[0].mxu0 %v10546
  %v10647 = vpop.f32.mrb[0].mxu0
  %v10648 = vadd.f32 0.0, %v10647
  %v10649 = vpop.f32.mrb[0].mxu0
  %v10650 = vpop.f32.mrb[0].mxu0
  %v10651 = vadd.f32 0.0, %v10650
  %v10652 = vpop.f32.mrb[0].mxu0
  %10653 = vmatprep.mubr.bf16.mxu0 0
  %10654 = vmatmul.mubr.bf16.gmra.mrb[0].mxu0 %v10547
  %v10655 = vpop.f32.mrb[0].mxu0
  %v10656 = vadd.f32 0.0, %v10655
  %v10657 = vpop.f32.mrb[0].mxu0
  %v10658 = vpop.f32.mrb[0].mxu0
  %v10659 = vpop.f32.mrb[0].mxu0
  %10660 = vdwg.mxu0
  %v10661 = vadd.f32 %v10477, %v10648
  %v10662 = vadd.f32 %v10478, %v10651
  %v10663 = vadd.f32 %v10479, %v10656
  %s10664 = scalar_lea.vmem %s6, 108
  %v10665 = vld [vmem:[%s10664] sm:$0xf]
  %v10666 = vld [vmem:[%s10664 + $0x4] sm:$0xf]
  %v10667 = vld [vmem:[%s10664 + $0x8] sm:$0xf]
  %v10671 = vunpack.c.l.b16 %v10665
  %v10672 = vunpack.c.l.b16 %v10666
  %v10673 = vunpack.c.l.b16 %v10667
  %v10674 = vpack.c.b16 %v10672, %v10671
  %v10675 = vpack.c.b16 %v10673, %v10673
  %v10677 = vsel %vm9023, %v10674, 0
  %v10680 = vsel %vm9023, %v10675, 0
  %10682 = vmatprep.subr.bf16.mxu0 0
  %10683 = vmatpush1.bf16.msra.mxu0 %v9005
  %10684 = vmatprep.subr.bf16.mxu0 0
  %10685 = vmatpush1.bf16.msra.mxu0 %v9006
  %10686 = vmatprep.subr.bf16.mxu0 0
  %10687 = vmatpush1.bf16.msra.mxu0 %v9007
  %10688 = vmatprep.subr.bf16.mxu0 0
  %10689 = vmatpush1.bf16.msra.mxu0 %v9008
  %10690 = vmatprep.subr.bf16.mxu0 0
  %10691 = vmatpush1.bf16.msra.mxu0 %v9009
  %10692 = vmatprep.subr.bf16.mxu0 0
  %10693 = vmatpush1.bf16.msra.mxu0 %v9010
  %10694 = vmatprep.subr.bf16.mxu0 0
  %10695 = vmatpush1.bf16.msra.mxu0 %v9031
  %10696 = vmatprep.subr.bf16.mxu0 0
  %10697 = vmatpush1.bf16.msra.mxu0 0
  %10698 = vmatprep.subr.bf16.mxu0 0
  %10699 = vmatpush1.bf16.msra.mxu0 0
  %10700 = vmatprep.subr.bf16.mxu0 0
  %10701 = vmatpush1.bf16.msra.mxu0 0
  %10702 = vmatprep.subr.bf16.mxu0 0
  %10703 = vmatpush1.bf16.msra.mxu0 0
  %10704 = vmatprep.subr.bf16.mxu0 0
  %10705 = vmatpush1.bf16.msra.mxu0 0
  %10706 = vmatprep.subr.bf16.mxu0 0
  %10707 = vmatpush1.bf16.msra.mxu0 0
  %10708 = vmatprep.subr.bf16.mxu0 0
  %10709 = vmatpush1.bf16.msra.mxu0 0
  %10710 = vmatprep.subr.bf16.mxu0 0
  %10711 = vmatpush1.bf16.msra.mxu0 0
  %10712 = vmatprep.subr.bf16.mxu0 0
  %10713 = vmatpush1.bf16.msra.mxu0 0
  %10714 = vmatprep.mubr.bf16.mxu0 0
  %10715 = vmatmul.mubr.bf16.gmra.mrb[0].mxu0 %v10677
  %v10716 = vpop.f32.mrb[0].mxu0
  %v10717 = vadd.f32 0.0, %v10716
  %v10718 = vpop.f32.mrb[0].mxu0
  %v10719 = vpop.f32.mrb[0].mxu0
  %v10720 = vadd.f32 0.0, %v10719
  %v10721 = vpop.f32.mrb[0].mxu0
  %10722 = vmatprep.mubr.bf16.mxu0 0
  %10723 = vmatmul.mubr.bf16.gmra.mrb[0].mxu0 %v10680
  %v10724 = vpop.f32.mrb[0].mxu0
  %v10725 = vadd.f32 0.0, %v10724
  %v10726 = vpop.f32.mrb[0].mxu0
  %v10727 = vpop.f32.mrb[0].mxu0
  %v10728 = vpop.f32.mrb[0].mxu0
  %10729 = vdwg.mxu0
  %v10730 = vpack.c.bf16 %v10720, %v10717
  %v10731 = vpack.c.bf16 %v10725, %v10725
  %s10732 = scalar_lea.vmem %s7, 576
  %v10733 = vld [vmem:[%s10732] sm:$0xf]
  %v10734 = vld [vmem:[%s10732 + $0x4] sm:$0xf]
  %v10735 = vld [vmem:[%s10732 + $0x8] sm:$0xf]
  %v10736 = vld [vmem:[%s10732 + $0xc] sm:$0xf]
  %v10737 = vld [vmem:[%s10732 + $0x10] sm:$0xf]
  %v10738 = vld [vmem:[%s10732 + $0x14] sm:$0xf]
  %v10739 = vld [vmem:[%s10732 + $0x18] sm:$0xf]
  %v10740 = vld [vmem:[%s10732 + $0x1c] sm:$0xf]
  %v10741 = vld [vmem:[%s10732 + $0x20] sm:$0xf]
  %v10742 = vld [vmem:[%s10732 + $0x24] sm:$0xf]
  %v10743 = vld [vmem:[%s10732 + $0x28] sm:$0xf]
  %v10744 = vld [vmem:[%s10732 + $0x2c] sm:$0xf]
  %v10745 = vld [vmem:[%s10732 + $0x30] sm:$0xf]
  %v10746 = vld [vmem:[%s10732 + $0x34] sm:$0xf]
  %v10747 = vld [vmem:[%s10732 + $0x38] sm:$0xf]
  %v10748 = vld [vmem:[%s10732 + $0x3c] sm:$0xf]
  %v10765 = vunpack.c.l.b16 %v10733
  %v10766 = vunpack.c.l.b16 %v10734
  %v10767 = vunpack.c.l.b16 %v10735
  %v10768 = vunpack.c.l.b16 %v10736
  %v10769 = vunpack.c.l.b16 %v10737
  %v10770 = vunpack.c.l.b16 %v10738
  %v10771 = vunpack.c.l.b16 %v10739
  %v10772 = vunpack.c.l.b16 %v10740
  %v10773 = vunpack.c.l.b16 %v10741
  %v10774 = vunpack.c.l.b16 %v10742
  %v10775 = vunpack.c.l.b16 %v10743
  %v10776 = vunpack.c.l.b16 %v10744
  %v10777 = vunpack.c.l.b16 %v10745
  %v10778 = vunpack.c.l.b16 %v10746
  %v10779 = vunpack.c.l.b16 %v10747
  %v10780 = vunpack.c.l.b16 %v10748
  %v10781 = vpack.c.b16 %v10766, %v10765
  %v10782 = vpack.c.b16 %v10768, %v10767
  %v10783 = vpack.c.b16 %v10770, %v10769
  %v10784 = vpack.c.b16 %v10772, %v10771
  %v10785 = vpack.c.b16 %v10774, %v10773
  %v10786 = vpack.c.b16 %v10776, %v10775
  %v10787 = vpack.c.b16 %v10778, %v10777
  %v10788 = vpack.c.b16 %v10780, %v10779
  %10797 = vmatprep.subr.bf16.mxu0 0
  %10798 = vmatpush1.bf16.msra.mxu0 %v10781
  %10799 = vmatprep.subr.bf16.mxu0 0
  %10800 = vmatpush1.bf16.msra.mxu0 %v10782
  %10801 = vmatprep.subr.bf16.mxu0 0
  %10802 = vmatpush1.bf16.msra.mxu0 %v10783
  %10803 = vmatprep.subr.bf16.mxu0 0
  %10804 = vmatpush1.bf16.msra.mxu0 %v10784
  %10805 = vmatprep.subr.bf16.mxu0 0
  %10806 = vmatpush1.bf16.msra.mxu0 %v10785
  %10807 = vmatprep.subr.bf16.mxu0 0
  %10808 = vmatpush1.bf16.msra.mxu0 %v10786
  %10809 = vmatprep.subr.bf16.mxu0 0
  %10810 = vmatpush1.bf16.msra.mxu0 %v10787
  %10811 = vmatprep.subr.bf16.mxu0 0
  %10812 = vmatpush1.bf16.msra.mxu0 %v10788
  %10813 = vmatprep.subr.bf16.mxu0 0
  %10814 = vmatpush1.bf16.msra.mxu0 0
  %10815 = vmatprep.subr.bf16.mxu0 0
  %10816 = vmatpush1.bf16.msra.mxu0 0
  %10817 = vmatprep.subr.bf16.mxu0 0
  %10818 = vmatpush1.bf16.msra.mxu0 0
  %10819 = vmatprep.subr.bf16.mxu0 0
  %10820 = vmatpush1.bf16.msra.mxu0 0
  %10821 = vmatprep.subr.bf16.mxu0 0
  %10822 = vmatpush1.bf16.msra.mxu0 0
  %10823 = vmatprep.subr.bf16.mxu0 0
  %10824 = vmatpush1.bf16.msra.mxu0 0
  %10825 = vmatprep.subr.bf16.mxu0 0
  %10826 = vmatpush1.bf16.msra.mxu0 0
  %10827 = vmatprep.subr.bf16.mxu0 0
  %10828 = vmatpush1.bf16.msra.mxu0 0
  %10829 = vmatprep.mubr.bf16.mxu0 0
  %10830 = vmatmul.mubr.bf16.gmra.mrb[0].mxu0 %v10730
  %v10831 = vpop.f32.mrb[0].mxu0
  %v10832 = vadd.f32 0.0, %v10831
  %v10833 = vpop.f32.mrb[0].mxu0
  %v10834 = vpop.f32.mrb[0].mxu0
  %v10835 = vadd.f32 0.0, %v10834
  %v10836 = vpop.f32.mrb[0].mxu0
  %10837 = vmatprep.mubr.bf16.mxu0 0
  %10838 = vmatmul.mubr.bf16.gmra.mrb[0].mxu0 %v10731
  %v10839 = vpop.f32.mrb[0].mxu0
  %v10840 = vadd.f32 0.0, %v10839
  %v10841 = vpop.f32.mrb[0].mxu0
  %v10842 = vpop.f32.mrb[0].mxu0
  %v10843 = vpop.f32.mrb[0].mxu0
  %10844 = vdwg.mxu0
  %v10845 = vadd.f32 %v10661, %v10832
  %v10846 = vadd.f32 %v10662, %v10835
  %v10847 = vadd.f32 %v10663, %v10840
  %s10848 = scalar_lea.vmem %s6, 120
  %v10849 = vld [vmem:[%s10848] sm:$0xf]
  %v10850 = vld [vmem:[%s10848 + $0x4] sm:$0xf]
  %v10851 = vld [vmem:[%s10848 + $0x8] sm:$0xf]
  %v10855 = vunpack.c.l.b16 %v10849
  %v10856 = vunpack.c.l.b16 %v10850
  %v10857 = vunpack.c.l.b16 %v10851
  %v10858 = vpack.c.b16 %v10856, %v10855
  %v10859 = vpack.c.b16 %v10857, %v10857
  %v10861 = vsel %vm9023, %v10858, 0
  %v10864 = vsel %vm9023, %v10859, 0
  %10866 = vmatprep.subr.bf16.mxu0 0
  %10867 = vmatpush1.bf16.msra.mxu0 %v9005
  %10868 = vmatprep.subr.bf16.mxu0 0
  %10869 = vmatpush1.bf16.msra.mxu0 %v9006
  %10870 = vmatprep.subr.bf16.mxu0 0
  %10871 = vmatpush1.bf16.msra.mxu0 %v9007
  %10872 = vmatprep.subr.bf16.mxu0 0
  %10873 = vmatpush1.bf16.msra.mxu0 %v9008
  %10874 = vmatprep.subr.bf16.mxu0 0
  %10875 = vmatpush1.bf16.msra.mxu0 %v9009
  %10876 = vmatprep.subr.bf16.mxu0 0
  %10877 = vmatpush1.bf16.msra.mxu0 %v9010
  %10878 = vmatprep.subr.bf16.mxu0 0
  %10879 = vmatpush1.bf16.msra.mxu0 %v9031
  %10880 = vmatprep.subr.bf16.mxu0 0
  %10881 = vmatpush1.bf16.msra.mxu0 0
  %10882 = vmatprep.subr.bf16.mxu0 0
  %10883 = vmatpush1.bf16.msra.mxu0 0
  %10884 = vmatprep.subr.bf16.mxu0 0
  %10885 = vmatpush1.bf16.msra.mxu0 0
  %10886 = vmatprep.subr.bf16.mxu0 0
  %10887 = vmatpush1.bf16.msra.mxu0 0
  %10888 = vmatprep.subr.bf16.mxu0 0
  %10889 = vmatpush1.bf16.msra.mxu0 0
  %10890 = vmatprep.subr.bf16.mxu0 0
  %10891 = vmatpush1.bf16.msra.mxu0 0
  %10892 = vmatprep.subr.bf16.mxu0 0
  %10893 = vmatpush1.bf16.msra.mxu0 0
  %10894 = vmatprep.subr.bf16.mxu0 0
  %10895 = vmatpush1.bf16.msra.mxu0 0
  %10896 = vmatprep.subr.bf16.mxu0 0
  %10897 = vmatpush1.bf16.msra.mxu0 0
  %10898 = vmatprep.mubr.bf16.mxu0 0
  %10899 = vmatmul.mubr.bf16.gmra.mrb[0].mxu0 %v10861
  %v10900 = vpop.f32.mrb[0].mxu0
  %v10901 = vadd.f32 0.0, %v10900
  %v10902 = vpop.f32.mrb[0].mxu0
  %v10903 = vpop.f32.mrb[0].mxu0
  %v10904 = vadd.f32 0.0, %v10903
  %v10905 = vpop.f32.mrb[0].mxu0
  %10906 = vmatprep.mubr.bf16.mxu0 0
  %10907 = vmatmul.mubr.bf16.gmra.mrb[0].mxu0 %v10864
  %v10908 = vpop.f32.mrb[0].mxu0
  %v10909 = vadd.f32 0.0, %v10908
  %v10910 = vpop.f32.mrb[0].mxu0
  %v10911 = vpop.f32.mrb[0].mxu0
  %v10912 = vpop.f32.mrb[0].mxu0
  %10913 = vdwg.mxu0
  %v10914 = vpack.c.bf16 %v10904, %v10901
  %v10915 = vpack.c.bf16 %v10909, %v10909
  %s10916 = scalar_lea.vmem %s7, 640
  %v10917 = vld [vmem:[%s10916] sm:$0xf]
  %v10918 = vld [vmem:[%s10916 + $0x4] sm:$0xf]
  %v10919 = vld [vmem:[%s10916 + $0x8] sm:$0xf]
  %v10920 = vld [vmem:[%s10916 + $0xc] sm:$0xf]
  %v10921 = vld [vmem:[%s10916 + $0x10] sm:$0xf]
  %v10922 = vld [vmem:[%s10916 + $0x14] sm:$0xf]
  %v10923 = vld [vmem:[%s10916 + $0x18] sm:$0xf]
  %v10924 = vld [vmem:[%s10916 + $0x1c] sm:$0xf]
  %v10925 = vld [vmem:[%s10916 + $0x20] sm:$0xf]
  %v10926 = vld [vmem:[%s10916 + $0x24] sm:$0xf]
  %v10927 = vld [vmem:[%s10916 + $0x28] sm:$0xf]
  %v10928 = vld [vmem:[%s10916 + $0x2c] sm:$0xf]
  %v10929 = vld [vmem:[%s10916 + $0x30] sm:$0xf]
  %v10930 = vld [vmem:[%s10916 + $0x34] sm:$0xf]
  %v10931 = vld [vmem:[%s10916 + $0x38] sm:$0xf]
  %v10932 = vld [vmem:[%s10916 + $0x3c] sm:$0xf]
  %v10949 = vunpack.c.l.b16 %v10917
  %v10950 = vunpack.c.l.b16 %v10918
  %v10951 = vunpack.c.l.b16 %v10919
  %v10952 = vunpack.c.l.b16 %v10920
  %v10953 = vunpack.c.l.b16 %v10921
  %v10954 = vunpack.c.l.b16 %v10922
  %v10955 = vunpack.c.l.b16 %v10923
  %v10956 = vunpack.c.l.b16 %v10924
  %v10957 = vunpack.c.l.b16 %v10925
  %v10958 = vunpack.c.l.b16 %v10926
  %v10959 = vunpack.c.l.b16 %v10927
  %v10960 = vunpack.c.l.b16 %v10928
  %v10961 = vunpack.c.l.b16 %v10929
  %v10962 = vunpack.c.l.b16 %v10930
  %v10963 = vunpack.c.l.b16 %v10931
  %v10964 = vunpack.c.l.b16 %v10932
  %v10965 = vpack.c.b16 %v10950, %v10949
  %v10966 = vpack.c.b16 %v10952, %v10951
  %v10967 = vpack.c.b16 %v10954, %v10953
  %v10968 = vpack.c.b16 %v10956, %v10955
  %v10969 = vpack.c.b16 %v10958, %v10957
  %v10970 = vpack.c.b16 %v10960, %v10959
  %v10971 = vpack.c.b16 %v10962, %v10961
  %v10972 = vpack.c.b16 %v10964, %v10963
  %10981 = vmatprep.subr.bf16.mxu0 0
  %10982 = vmatpush1.bf16.msra.mxu0 %v10965
  %10983 = vmatprep.subr.bf16.mxu0 0
  %10984 = vmatpush1.bf16.msra.mxu0 %v10966
  %10985 = vmatprep.subr.bf16.mxu0 0
  %10986 = vmatpush1.bf16.msra.mxu0 %v10967
  %10987 = vmatprep.subr.bf16.mxu0 0
  %10988 = vmatpush1.bf16.msra.mxu0 %v10968
  %10989 = vmatprep.subr.bf16.mxu0 0
  %10990 = vmatpush1.bf16.msra.mxu0 %v10969
  %10991 = vmatprep.subr.bf16.mxu0 0
  %10992 = vmatpush1.bf16.msra.mxu0 %v10970
  %10993 = vmatprep.subr.bf16.mxu0 0
  %10994 = vmatpush1.bf16.msra.mxu0 %v10971
  %10995 = vmatprep.subr.bf16.mxu0 0
  %10996 = vmatpush1.bf16.msra.mxu0 %v10972
  %10997 = vmatprep.subr.bf16.mxu0 0
  %10998 = vmatpush1.bf16.msra.mxu0 0
  %10999 = vmatprep.subr.bf16.mxu0 0
  %11000 = vmatpush1.bf16.msra.mxu0 0
  %11001 = vmatprep.subr.bf16.mxu0 0
  %11002 = vmatpush1.bf16.msra.mxu0 0
  %11003 = vmatprep.subr.bf16.mxu0 0
  %11004 = vmatpush1.bf16.msra.mxu0 0
  %11005 = vmatprep.subr.bf16.mxu0 0
  %11006 = vmatpush1.bf16.msra.mxu0 0
  %11007 = vmatprep.subr.bf16.mxu0 0
  %11008 = vmatpush1.bf16.msra.mxu0 0
  %11009 = vmatprep.subr.bf16.mxu0 0
  %11010 = vmatpush1.bf16.msra.mxu0 0
  %11011 = vmatprep.subr.bf16.mxu0 0
  %11012 = vmatpush1.bf16.msra.mxu0 0
  %11013 = vmatprep.mubr.bf16.mxu0 0
  %11014 = vmatmul.mubr.bf16.gmra.mrb[0].mxu0 %v10914
  %v11015 = vpop.f32.mrb[0].mxu0
  %v11016 = vadd.f32 0.0, %v11015
  %v11017 = vpop.f32.mrb[0].mxu0
  %v11018 = vpop.f32.mrb[0].mxu0
  %v11019 = vadd.f32 0.0, %v11018
  %v11020 = vpop.f32.mrb[0].mxu0
  %11021 = vmatprep.mubr.bf16.mxu0 0
  %11022 = vmatmul.mubr.bf16.gmra.mrb[0].mxu0 %v10915
  %v11023 = vpop.f32.mrb[0].mxu0
  %v11024 = vadd.f32 0.0, %v11023
  %v11025 = vpop.f32.mrb[0].mxu0
  %v11026 = vpop.f32.mrb[0].mxu0
  %v11027 = vpop.f32.mrb[0].mxu0
  %11028 = vdwg.mxu0
  %v11029 = vadd.f32 %v10845, %v11016
  %v11030 = vadd.f32 %v10846, %v11019
  %v11031 = vadd.f32 %v10847, %v11024
  %s11032 = scalar_lea.vmem %s6, 132
  %v11033 = vld [vmem:[%s11032] sm:$0xf]
  %v11034 = vld [vmem:[%s11032 + $0x4] sm:$0xf]
  %v11035 = vld [vmem:[%s11032 + $0x8] sm:$0xf]
  %v11039 = vunpack.c.l.b16 %v11033
  %v11040 = vunpack.c.l.b16 %v11034
  %v11041 = vunpack.c.l.b16 %v11035
  %v11042 = vpack.c.b16 %v11040, %v11039
  %v11043 = vpack.c.b16 %v11041, %v11041
  %v11045 = vsel %vm9023, %v11042, 0
  %v11048 = vsel %vm9023, %v11043, 0
  %11050 = vmatprep.subr.bf16.mxu0 0
  %11051 = vmatpush1.bf16.msra.mxu0 %v9005
  %11052 = vmatprep.subr.bf16.mxu0 0
  %11053 = vmatpush1.bf16.msra.mxu0 %v9006
  %11054 = vmatprep.subr.bf16.mxu0 0
  %11055 = vmatpush1.bf16.msra.mxu0 %v9007
  %11056 = vmatprep.subr.bf16.mxu0 0
  %11057 = vmatpush1.bf16.msra.mxu0 %v9008
  %11058 = vmatprep.subr.bf16.mxu0 0
  %11059 = vmatpush1.bf16.msra.mxu0 %v9009
  %11060 = vmatprep.subr.bf16.mxu0 0
  %11061 = vmatpush1.bf16.msra.mxu0 %v9010
  %11062 = vmatprep.subr.bf16.mxu0 0
  %11063 = vmatpush1.bf16.msra.mxu0 %v9031
  %11064 = vmatprep.subr.bf16.mxu0 0
  %11065 = vmatpush1.bf16.msra.mxu0 0
  %11066 = vmatprep.subr.bf16.mxu0 0
  %11067 = vmatpush1.bf16.msra.mxu0 0
  %11068 = vmatprep.subr.bf16.mxu0 0
  %11069 = vmatpush1.bf16.msra.mxu0 0
  %11070 = vmatprep.subr.bf16.mxu0 0
  %11071 = vmatpush1.bf16.msra.mxu0 0
  %11072 = vmatprep.subr.bf16.mxu0 0
  %11073 = vmatpush1.bf16.msra.mxu0 0
  %11074 = vmatprep.subr.bf16.mxu0 0
  %11075 = vmatpush1.bf16.msra.mxu0 0
  %11076 = vmatprep.subr.bf16.mxu0 0
  %11077 = vmatpush1.bf16.msra.mxu0 0
  %11078 = vmatprep.subr.bf16.mxu0 0
  %11079 = vmatpush1.bf16.msra.mxu0 0
  %11080 = vmatprep.subr.bf16.mxu0 0
  %11081 = vmatpush1.bf16.msra.mxu0 0
  %11082 = vmatprep.mubr.bf16.mxu0 0
  %11083 = vmatmul.mubr.bf16.gmra.mrb[0].mxu0 %v11045
  %v11084 = vpop.f32.mrb[0].mxu0
  %v11085 = vadd.f32 0.0, %v11084
  %v11086 = vpop.f32.mrb[0].mxu0
  %v11087 = vpop.f32.mrb[0].mxu0
  %v11088 = vadd.f32 0.0, %v11087
  %v11089 = vpop.f32.mrb[0].mxu0
  %11090 = vmatprep.mubr.bf16.mxu0 0
  %11091 = vmatmul.mubr.bf16.gmra.mrb[0].mxu0 %v11048
  %v11092 = vpop.f32.mrb[0].mxu0
  %v11093 = vadd.f32 0.0, %v11092
  %v11094 = vpop.f32.mrb[0].mxu0
  %v11095 = vpop.f32.mrb[0].mxu0
  %v11096 = vpop.f32.mrb[0].mxu0
  %11097 = vdwg.mxu0
  %v11098 = vpack.c.bf16 %v11088, %v11085
  %v11099 = vpack.c.bf16 %v11093, %v11093
  %s11100 = scalar_lea.vmem %s7, 704
  %v11101 = vld [vmem:[%s11100] sm:$0xf]
  %v11102 = vld [vmem:[%s11100 + $0x4] sm:$0xf]
  %v11103 = vld [vmem:[%s11100 + $0x8] sm:$0xf]
  %v11104 = vld [vmem:[%s11100 + $0xc] sm:$0xf]
  %v11105 = vld [vmem:[%s11100 + $0x10] sm:$0xf]
  %v11106 = vld [vmem:[%s11100 + $0x14] sm:$0xf]
  %v11107 = vld [vmem:[%s11100 + $0x18] sm:$0xf]
  %v11108 = vld [vmem:[%s11100 + $0x1c] sm:$0xf]
  %v11109 = vld [vmem:[%s11100 + $0x20] sm:$0xf]
  %v11110 = vld [vmem:[%s11100 + $0x24] sm:$0xf]
  %v11111 = vld [vmem:[%s11100 + $0x28] sm:$0xf]
  %v11112 = vld [vmem:[%s11100 + $0x2c] sm:$0xf]
  %v11113 = vld [vmem:[%s11100 + $0x30] sm:$0xf]
  %v11114 = vld [vmem:[%s11100 + $0x34] sm:$0xf]
  %v11115 = vld [vmem:[%s11100 + $0x38] sm:$0xf]
  %v11116 = vld [vmem:[%s11100 + $0x3c] sm:$0xf]
  %v11133 = vunpack.c.l.b16 %v11101
  %v11134 = vunpack.c.l.b16 %v11102
  %v11135 = vunpack.c.l.b16 %v11103
  %v11136 = vunpack.c.l.b16 %v11104
  %v11137 = vunpack.c.l.b16 %v11105
  %v11138 = vunpack.c.l.b16 %v11106
  %v11139 = vunpack.c.l.b16 %v11107
  %v11140 = vunpack.c.l.b16 %v11108
  %v11141 = vunpack.c.l.b16 %v11109
  %v11142 = vunpack.c.l.b16 %v11110
  %v11143 = vunpack.c.l.b16 %v11111
  %v11144 = vunpack.c.l.b16 %v11112
  %v11145 = vunpack.c.l.b16 %v11113
  %v11146 = vunpack.c.l.b16 %v11114
  %v11147 = vunpack.c.l.b16 %v11115
  %v11148 = vunpack.c.l.b16 %v11116
  %v11149 = vpack.c.b16 %v11134, %v11133
  %v11150 = vpack.c.b16 %v11136, %v11135
  %v11151 = vpack.c.b16 %v11138, %v11137
  %v11152 = vpack.c.b16 %v11140, %v11139
  %v11153 = vpack.c.b16 %v11142, %v11141
  %v11154 = vpack.c.b16 %v11144, %v11143
  %v11155 = vpack.c.b16 %v11146, %v11145
  %v11156 = vpack.c.b16 %v11148, %v11147
  %11165 = vmatprep.subr.bf16.mxu0 0
  %11166 = vmatpush1.bf16.msra.mxu0 %v11149
  %11167 = vmatprep.subr.bf16.mxu0 0
  %11168 = vmatpush1.bf16.msra.mxu0 %v11150
  %11169 = vmatprep.subr.bf16.mxu0 0
  %11170 = vmatpush1.bf16.msra.mxu0 %v11151
  %11171 = vmatprep.subr.bf16.mxu0 0
  %11172 = vmatpush1.bf16.msra.mxu0 %v11152
  %11173 = vmatprep.subr.bf16.mxu0 0
  %11174 = vmatpush1.bf16.msra.mxu0 %v11153
  %11175 = vmatprep.subr.bf16.mxu0 0
  %11176 = vmatpush1.bf16.msra.mxu0 %v11154
  %11177 = vmatprep.subr.bf16.mxu0 0
  %11178 = vmatpush1.bf16.msra.mxu0 %v11155
  %11179 = vmatprep.subr.bf16.mxu0 0
  %11180 = vmatpush1.bf16.msra.mxu0 %v11156
  %11181 = vmatprep.subr.bf16.mxu0 0
  %11182 = vmatpush1.bf16.msra.mxu0 0
  %11183 = vmatprep.subr.bf16.mxu0 0
  %11184 = vmatpush1.bf16.msra.mxu0 0
  %11185 = vmatprep.subr.bf16.mxu0 0
  %11186 = vmatpush1.bf16.msra.mxu0 0
  %11187 = vmatprep.subr.bf16.mxu0 0
  %11188 = vmatpush1.bf16.msra.mxu0 0
  %11189 = vmatprep.subr.bf16.mxu0 0
  %11190 = vmatpush1.bf16.msra.mxu0 0
  %11191 = vmatprep.subr.bf16.mxu0 0
  %11192 = vmatpush1.bf16.msra.mxu0 0
  %11193 = vmatprep.subr.bf16.mxu0 0
  %11194 = vmatpush1.bf16.msra.mxu0 0
  %11195 = vmatprep.subr.bf16.mxu0 0
  %11196 = vmatpush1.bf16.msra.mxu0 0
  %11197 = vmatprep.mubr.bf16.mxu0 0
  %11198 = vmatmul.mubr.bf16.gmra.mrb[0].mxu0 %v11098
  %v11199 = vpop.f32.mrb[0].mxu0
  %v11200 = vadd.f32 0.0, %v11199
  %v11201 = vpop.f32.mrb[0].mxu0
  %v11202 = vpop.f32.mrb[0].mxu0
  %v11203 = vadd.f32 0.0, %v11202
  %v11204 = vpop.f32.mrb[0].mxu0
  %11205 = vmatprep.mubr.bf16.mxu0 0
  %11206 = vmatmul.mubr.bf16.gmra.mrb[0].mxu0 %v11099
  %v11207 = vpop.f32.mrb[0].mxu0
  %v11208 = vadd.f32 0.0, %v11207
  %v11209 = vpop.f32.mrb[0].mxu0
  %v11210 = vpop.f32.mrb[0].mxu0
  %v11211 = vpop.f32.mrb[0].mxu0
  %11212 = vdwg.mxu0
  %v11213 = vadd.f32 %v11029, %v11200
  %v11214 = vadd.f32 %v11030, %v11203
  %v11215 = vadd.f32 %v11031, %v11208
  %s11216 = scalar_lea.vmem %s6, 144
  %v11217 = vld [vmem:[%s11216] sm:$0xf]
  %v11218 = vld [vmem:[%s11216 + $0x4] sm:$0xf]
  %v11219 = vld [vmem:[%s11216 + $0x8] sm:$0xf]
  %v11223 = vunpack.c.l.b16 %v11217
  %v11224 = vunpack.c.l.b16 %v11218
  %v11225 = vunpack.c.l.b16 %v11219
  %v11226 = vpack.c.b16 %v11224, %v11223
  %v11227 = vpack.c.b16 %v11225, %v11225
  %v11229 = vsel %vm9023, %v11226, 0
  %v11232 = vsel %vm9023, %v11227, 0
  %11234 = vmatprep.subr.bf16.mxu0 0
  %11235 = vmatpush1.bf16.msra.mxu0 %v9005
  %11236 = vmatprep.subr.bf16.mxu0 0
  %11237 = vmatpush1.bf16.msra.mxu0 %v9006
  %11238 = vmatprep.subr.bf16.mxu0 0
  %11239 = vmatpush1.bf16.msra.mxu0 %v9007
  %11240 = vmatprep.subr.bf16.mxu0 0
  %11241 = vmatpush1.bf16.msra.mxu0 %v9008
  %11242 = vmatprep.subr.bf16.mxu0 0
  %11243 = vmatpush1.bf16.msra.mxu0 %v9009
  %11244 = vmatprep.subr.bf16.mxu0 0
  %11245 = vmatpush1.bf16.msra.mxu0 %v9010
  %11246 = vmatprep.subr.bf16.mxu0 0
  %11247 = vmatpush1.bf16.msra.mxu0 %v9031
  %11248 = vmatprep.subr.bf16.mxu0 0
  %11249 = vmatpush1.bf16.msra.mxu0 0
  %11250 = vmatprep.subr.bf16.mxu0 0
  %11251 = vmatpush1.bf16.msra.mxu0 0
  %11252 = vmatprep.subr.bf16.mxu0 0
  %11253 = vmatpush1.bf16.msra.mxu0 0
  %11254 = vmatprep.subr.bf16.mxu0 0
  %11255 = vmatpush1.bf16.msra.mxu0 0
  %11256 = vmatprep.subr.bf16.mxu0 0
  %11257 = vmatpush1.bf16.msra.mxu0 0
  %11258 = vmatprep.subr.bf16.mxu0 0
  %11259 = vmatpush1.bf16.msra.mxu0 0
  %11260 = vmatprep.subr.bf16.mxu0 0
  %11261 = vmatpush1.bf16.msra.mxu0 0
  %11262 = vmatprep.subr.bf16.mxu0 0
  %11263 = vmatpush1.bf16.msra.mxu0 0
  %11264 = vmatprep.subr.bf16.mxu0 0
  %11265 = vmatpush1.bf16.msra.mxu0 0
  %11266 = vmatprep.mubr.bf16.mxu0 0
  %11267 = vmatmul.mubr.bf16.gmra.mrb[0].mxu0 %v11229
  %v11268 = vpop.f32.mrb[0].mxu0
  %v11269 = vadd.f32 0.0, %v11268
  %v11270 = vpop.f32.mrb[0].mxu0
  %v11271 = vpop.f32.mrb[0].mxu0
  %v11272 = vadd.f32 0.0, %v11271
  %v11273 = vpop.f32.mrb[0].mxu0
  %11274 = vmatprep.mubr.bf16.mxu0 0
  %11275 = vmatmul.mubr.bf16.gmra.mrb[0].mxu0 %v11232
  %v11276 = vpop.f32.mrb[0].mxu0
  %v11277 = vadd.f32 0.0, %v11276
  %v11278 = vpop.f32.mrb[0].mxu0
  %v11279 = vpop.f32.mrb[0].mxu0
  %v11280 = vpop.f32.mrb[0].mxu0
  %11281 = vdwg.mxu0
  %v11282 = vpack.c.bf16 %v11272, %v11269
  %v11283 = vpack.c.bf16 %v11277, %v11277
  %s11284 = scalar_lea.vmem %s7, 768
  %v11285 = vld [vmem:[%s11284] sm:$0xf]
  %v11286 = vld [vmem:[%s11284 + $0x4] sm:$0xf]
  %v11287 = vld [vmem:[%s11284 + $0x8] sm:$0xf]
  %v11288 = vld [vmem:[%s11284 + $0xc] sm:$0xf]
  %v11289 = vld [vmem:[%s11284 + $0x10] sm:$0xf]
  %v11290 = vld [vmem:[%s11284 + $0x14] sm:$0xf]
  %v11291 = vld [vmem:[%s11284 + $0x18] sm:$0xf]
  %v11292 = vld [vmem:[%s11284 + $0x1c] sm:$0xf]
  %v11293 = vld [vmem:[%s11284 + $0x20] sm:$0xf]
  %v11294 = vld [vmem:[%s11284 + $0x24] sm:$0xf]
  %v11295 = vld [vmem:[%s11284 + $0x28] sm:$0xf]
  %v11296 = vld [vmem:[%s11284 + $0x2c] sm:$0xf]
  %v11297 = vld [vmem:[%s11284 + $0x30] sm:$0xf]
  %v11298 = vld [vmem:[%s11284 + $0x34] sm:$0xf]
  %v11299 = vld [vmem:[%s11284 + $0x38] sm:$0xf]
  %v11300 = vld [vmem:[%s11284 + $0x3c] sm:$0xf]
  %v11317 = vunpack.c.l.b16 %v11285
  %v11318 = vunpack.c.l.b16 %v11286
  %v11319 = vunpack.c.l.b16 %v11287
  %v11320 = vunpack.c.l.b16 %v11288
  %v11321 = vunpack.c.l.b16 %v11289
  %v11322 = vunpack.c.l.b16 %v11290
  %v11323 = vunpack.c.l.b16 %v11291
  %v11324 = vunpack.c.l.b16 %v11292
  %v11325 = vunpack.c.l.b16 %v11293
  %v11326 = vunpack.c.l.b16 %v11294
  %v11327 = vunpack.c.l.b16 %v11295
  %v11328 = vunpack.c.l.b16 %v11296
  %v11329 = vunpack.c.l.b16 %v11297
  %v11330 = vunpack.c.l.b16 %v11298
  %v11331 = vunpack.c.l.b16 %v11299
  %v11332 = vunpack.c.l.b16 %v11300
  %v11333 = vpack.c.b16 %v11318, %v11317
  %v11334 = vpack.c.b16 %v11320, %v11319
  %v11335 = vpack.c.b16 %v11322, %v11321
  %v11336 = vpack.c.b16 %v11324, %v11323
  %v11337 = vpack.c.b16 %v11326, %v11325
  %v11338 = vpack.c.b16 %v11328, %v11327
  %v11339 = vpack.c.b16 %v11330, %v11329
  %v11340 = vpack.c.b16 %v11332, %v11331
  %11349 = vmatprep.subr.bf16.mxu0 0
  %11350 = vmatpush1.bf16.msra.mxu0 %v11333
  %11351 = vmatprep.subr.bf16.mxu0 0
  %11352 = vmatpush1.bf16.msra.mxu0 %v11334
  %11353 = vmatprep.subr.bf16.mxu0 0
  %11354 = vmatpush1.bf16.msra.mxu0 %v11335
  %11355 = vmatprep.subr.bf16.mxu0 0
  %11356 = vmatpush1.bf16.msra.mxu0 %v11336
  %11357 = vmatprep.subr.bf16.mxu0 0
  %11358 = vmatpush1.bf16.msra.mxu0 %v11337
  %11359 = vmatprep.subr.bf16.mxu0 0
  %11360 = vmatpush1.bf16.msra.mxu0 %v11338
  %11361 = vmatprep.subr.bf16.mxu0 0
  %11362 = vmatpush1.bf16.msra.mxu0 %v11339
  %11363 = vmatprep.subr.bf16.mxu0 0
  %11364 = vmatpush1.bf16.msra.mxu0 %v11340
  %11365 = vmatprep.subr.bf16.mxu0 0
  %11366 = vmatpush1.bf16.msra.mxu0 0
  %11367 = vmatprep.subr.bf16.mxu0 0
  %11368 = vmatpush1.bf16.msra.mxu0 0
  %11369 = vmatprep.subr.bf16.mxu0 0
  %11370 = vmatpush1.bf16.msra.mxu0 0
  %11371 = vmatprep.subr.bf16.mxu0 0
  %11372 = vmatpush1.bf16.msra.mxu0 0
  %11373 = vmatprep.subr.bf16.mxu0 0
  %11374 = vmatpush1.bf16.msra.mxu0 0
  %11375 = vmatprep.subr.bf16.mxu0 0
  %11376 = vmatpush1.bf16.msra.mxu0 0
  %11377 = vmatprep.subr.bf16.mxu0 0
  %11378 = vmatpush1.bf16.msra.mxu0 0
  %11379 = vmatprep.subr.bf16.mxu0 0
  %11380 = vmatpush1.bf16.msra.mxu0 0
  %11381 = vmatprep.mubr.bf16.mxu0 0
  %11382 = vmatmul.mubr.bf16.gmra.mrb[0].mxu0 %v11282
  %v11383 = vpop.f32.mrb[0].mxu0
  %v11384 = vadd.f32 0.0, %v11383
  %v11385 = vpop.f32.mrb[0].mxu0
  %v11386 = vpop.f32.mrb[0].mxu0
  %v11387 = vadd.f32 0.0, %v11386
  %v11388 = vpop.f32.mrb[0].mxu0
  %11389 = vmatprep.mubr.bf16.mxu0 0
  %11390 = vmatmul.mubr.bf16.gmra.mrb[0].mxu0 %v11283
  %v11391 = vpop.f32.mrb[0].mxu0
  %v11392 = vadd.f32 0.0, %v11391
  %v11393 = vpop.f32.mrb[0].mxu0
  %v11394 = vpop.f32.mrb[0].mxu0
  %v11395 = vpop.f32.mrb[0].mxu0
  %11396 = vdwg.mxu0
  %v11397 = vadd.f32 %v11213, %v11384
  %v11398 = vadd.f32 %v11214, %v11387
  %v11399 = vadd.f32 %v11215, %v11392
  %s11400 = scalar_lea.vmem %s6, 156
  %v11401 = vld [vmem:[%s11400] sm:$0xf]
  %v11402 = vld [vmem:[%s11400 + $0x4] sm:$0xf]
  %v11403 = vld [vmem:[%s11400 + $0x8] sm:$0xf]
  %v11407 = vunpack.c.l.b16 %v11401
  %v11408 = vunpack.c.l.b16 %v11402
  %v11409 = vunpack.c.l.b16 %v11403
  %v11410 = vpack.c.b16 %v11408, %v11407
  %v11411 = vpack.c.b16 %v11409, %v11409
  %v11413 = vsel %vm9023, %v11410, 0
  %v11416 = vsel %vm9023, %v11411, 0
  %11418 = vmatprep.subr.bf16.mxu0 0
  %11419 = vmatpush1.bf16.msra.mxu0 %v9005
  %11420 = vmatprep.subr.bf16.mxu0 0
  %11421 = vmatpush1.bf16.msra.mxu0 %v9006
  %11422 = vmatprep.subr.bf16.mxu0 0
  %11423 = vmatpush1.bf16.msra.mxu0 %v9007
  %11424 = vmatprep.subr.bf16.mxu0 0
  %11425 = vmatpush1.bf16.msra.mxu0 %v9008
  %11426 = vmatprep.subr.bf16.mxu0 0
  %11427 = vmatpush1.bf16.msra.mxu0 %v9009
  %11428 = vmatprep.subr.bf16.mxu0 0
  %11429 = vmatpush1.bf16.msra.mxu0 %v9010
  %11430 = vmatprep.subr.bf16.mxu0 0
  %11431 = vmatpush1.bf16.msra.mxu0 %v9031
  %11432 = vmatprep.subr.bf16.mxu0 0
  %11433 = vmatpush1.bf16.msra.mxu0 0
  %11434 = vmatprep.subr.bf16.mxu0 0
  %11435 = vmatpush1.bf16.msra.mxu0 0
  %11436 = vmatprep.subr.bf16.mxu0 0
  %11437 = vmatpush1.bf16.msra.mxu0 0
  %11438 = vmatprep.subr.bf16.mxu0 0
  %11439 = vmatpush1.bf16.msra.mxu0 0
  %11440 = vmatprep.subr.bf16.mxu0 0
  %11441 = vmatpush1.bf16.msra.mxu0 0
  %11442 = vmatprep.subr.bf16.mxu0 0
  %11443 = vmatpush1.bf16.msra.mxu0 0
  %11444 = vmatprep.subr.bf16.mxu0 0
  %11445 = vmatpush1.bf16.msra.mxu0 0
  %11446 = vmatprep.subr.bf16.mxu0 0
  %11447 = vmatpush1.bf16.msra.mxu0 0
  %11448 = vmatprep.subr.bf16.mxu0 0
  %11449 = vmatpush1.bf16.msra.mxu0 0
  %11450 = vmatprep.mubr.bf16.mxu0 0
  %11451 = vmatmul.mubr.bf16.gmra.mrb[0].mxu0 %v11413
  %v11452 = vpop.f32.mrb[0].mxu0
  %v11453 = vadd.f32 0.0, %v11452
  %v11454 = vpop.f32.mrb[0].mxu0
  %v11455 = vpop.f32.mrb[0].mxu0
  %v11456 = vadd.f32 0.0, %v11455
  %v11457 = vpop.f32.mrb[0].mxu0
  %11458 = vmatprep.mubr.bf16.mxu0 0
  %11459 = vmatmul.mubr.bf16.gmra.mrb[0].mxu0 %v11416
  %v11460 = vpop.f32.mrb[0].mxu0
  %v11461 = vadd.f32 0.0, %v11460
  %v11462 = vpop.f32.mrb[0].mxu0
  %v11463 = vpop.f32.mrb[0].mxu0
  %v11464 = vpop.f32.mrb[0].mxu0
  %11465 = vdwg.mxu0
  %v11466 = vpack.c.bf16 %v11456, %v11453
  %v11467 = vpack.c.bf16 %v11461, %v11461
  %s11468 = scalar_lea.vmem %s7, 832
  %v11469 = vld [vmem:[%s11468] sm:$0xf]
  %v11470 = vld [vmem:[%s11468 + $0x4] sm:$0xf]
  %v11471 = vld [vmem:[%s11468 + $0x8] sm:$0xf]
  %v11472 = vld [vmem:[%s11468 + $0xc] sm:$0xf]
  %v11473 = vld [vmem:[%s11468 + $0x10] sm:$0xf]
  %v11474 = vld [vmem:[%s11468 + $0x14] sm:$0xf]
  %v11475 = vld [vmem:[%s11468 + $0x18] sm:$0xf]
  %v11476 = vld [vmem:[%s11468 + $0x1c] sm:$0xf]
  %v11477 = vld [vmem:[%s11468 + $0x20] sm:$0xf]
  %v11478 = vld [vmem:[%s11468 + $0x24] sm:$0xf]
  %v11479 = vld [vmem:[%s11468 + $0x28] sm:$0xf]
  %v11480 = vld [vmem:[%s11468 + $0x2c] sm:$0xf]
  %v11481 = vld [vmem:[%s11468 + $0x30] sm:$0xf]
  %v11482 = vld [vmem:[%s11468 + $0x34] sm:$0xf]
  %v11483 = vld [vmem:[%s11468 + $0x38] sm:$0xf]
  %v11484 = vld [vmem:[%s11468 + $0x3c] sm:$0xf]
  %v11501 = vunpack.c.l.b16 %v11469
  %v11502 = vunpack.c.l.b16 %v11470
  %v11503 = vunpack.c.l.b16 %v11471
  %v11504 = vunpack.c.l.b16 %v11472
  %v11505 = vunpack.c.l.b16 %v11473
  %v11506 = vunpack.c.l.b16 %v11474
  %v11507 = vunpack.c.l.b16 %v11475
  %v11508 = vunpack.c.l.b16 %v11476
  %v11509 = vunpack.c.l.b16 %v11477
  %v11510 = vunpack.c.l.b16 %v11478
  %v11511 = vunpack.c.l.b16 %v11479
  %v11512 = vunpack.c.l.b16 %v11480
  %v11513 = vunpack.c.l.b16 %v11481
  %v11514 = vunpack.c.l.b16 %v11482
  %v11515 = vunpack.c.l.b16 %v11483
  %v11516 = vunpack.c.l.b16 %v11484
  %v11517 = vpack.c.b16 %v11502, %v11501
  %v11518 = vpack.c.b16 %v11504, %v11503
  %v11519 = vpack.c.b16 %v11506, %v11505
  %v11520 = vpack.c.b16 %v11508, %v11507
  %v11521 = vpack.c.b16 %v11510, %v11509
  %v11522 = vpack.c.b16 %v11512, %v11511
  %v11523 = vpack.c.b16 %v11514, %v11513
  %v11524 = vpack.c.b16 %v11516, %v11515
  %11533 = vmatprep.subr.bf16.mxu0 0
  %11534 = vmatpush1.bf16.msra.mxu0 %v11517
  %11535 = vmatprep.subr.bf16.mxu0 0
  %11536 = vmatpush1.bf16.msra.mxu0 %v11518
  %11537 = vmatprep.subr.bf16.mxu0 0
  %11538 = vmatpush1.bf16.msra.mxu0 %v11519
  %11539 = vmatprep.subr.bf16.mxu0 0
  %11540 = vmatpush1.bf16.msra.mxu0 %v11520
  %11541 = vmatprep.subr.bf16.mxu0 0
  %11542 = vmatpush1.bf16.msra.mxu0 %v11521
  %11543 = vmatprep.subr.bf16.mxu0 0
  %11544 = vmatpush1.bf16.msra.mxu0 %v11522
  %11545 = vmatprep.subr.bf16.mxu0 0
  %11546 = vmatpush1.bf16.msra.mxu0 %v11523
  %11547 = vmatprep.subr.bf16.mxu0 0
  %11548 = vmatpush1.bf16.msra.mxu0 %v11524
  %11549 = vmatprep.subr.bf16.mxu0 0
  %11550 = vmatpush1.bf16.msra.mxu0 0
  %11551 = vmatprep.subr.bf16.mxu0 0
  %11552 = vmatpush1.bf16.msra.mxu0 0
  %11553 = vmatprep.subr.bf16.mxu0 0
  %11554 = vmatpush1.bf16.msra.mxu0 0
  %11555 = vmatprep.subr.bf16.mxu0 0
  %11556 = vmatpush1.bf16.msra.mxu0 0
  %11557 = vmatprep.subr.bf16.mxu0 0
  %11558 = vmatpush1.bf16.msra.mxu0 0
  %11559 = vmatprep.subr.bf16.mxu0 0
  %11560 = vmatpush1.bf16.msra.mxu0 0
  %11561 = vmatprep.subr.bf16.mxu0 0
  %11562 = vmatpush1.bf16.msra.mxu0 0
  %11563 = vmatprep.subr.bf16.mxu0 0
  %11564 = vmatpush1.bf16.msra.mxu0 0
  %11565 = vmatprep.mubr.bf16.mxu0 0
  %11566 = vmatmul.mubr.bf16.gmra.mrb[0].mxu0 %v11466
  %v11567 = vpop.f32.mrb[0].mxu0
  %v11568 = vadd.f32 0.0, %v11567
  %v11569 = vpop.f32.mrb[0].mxu0
  %v11570 = vpop.f32.mrb[0].mxu0
  %v11571 = vadd.f32 0.0, %v11570
  %v11572 = vpop.f32.mrb[0].mxu0
  %11573 = vmatprep.mubr.bf16.mxu0 0
  %11574 = vmatmul.mubr.bf16.gmra.mrb[0].mxu0 %v11467
  %v11575 = vpop.f32.mrb[0].mxu0
  %v11576 = vadd.f32 0.0, %v11575
  %v11577 = vpop.f32.mrb[0].mxu0
  %v11578 = vpop.f32.mrb[0].mxu0
  %v11579 = vpop.f32.mrb[0].mxu0
  %11580 = vdwg.mxu0
  %v11581 = vadd.f32 %v11397, %v11568
  %v11582 = vadd.f32 %v11398, %v11571
  %v11583 = vadd.f32 %v11399, %v11576
  %s11584 = scalar_lea.vmem %s6, 168
  %v11585 = vld [vmem:[%s11584] sm:$0xf]
  %v11586 = vld [vmem:[%s11584 + $0x4] sm:$0xf]
  %v11587 = vld [vmem:[%s11584 + $0x8] sm:$0xf]
  %v11591 = vunpack.c.l.b16 %v11585
  %v11592 = vunpack.c.l.b16 %v11586
  %v11593 = vunpack.c.l.b16 %v11587
  %v11594 = vpack.c.b16 %v11592, %v11591
  %v11595 = vpack.c.b16 %v11593, %v11593
  %v11597 = vsel %vm9023, %v11594, 0
  %v11600 = vsel %vm9023, %v11595, 0
  %11602 = vmatprep.subr.bf16.mxu0 0
  %11603 = vmatpush1.bf16.msra.mxu0 %v9005
  %11604 = vmatprep.subr.bf16.mxu0 0
  %11605 = vmatpush1.bf16.msra.mxu0 %v9006
  %11606 = vmatprep.subr.bf16.mxu0 0
  %11607 = vmatpush1.bf16.msra.mxu0 %v9007
  %11608 = vmatprep.subr.bf16.mxu0 0
  %11609 = vmatpush1.bf16.msra.mxu0 %v9008
  %11610 = vmatprep.subr.bf16.mxu0 0
  %11611 = vmatpush1.bf16.msra.mxu0 %v9009
  %11612 = vmatprep.subr.bf16.mxu0 0
  %11613 = vmatpush1.bf16.msra.mxu0 %v9010
  %11614 = vmatprep.subr.bf16.mxu0 0
  %11615 = vmatpush1.bf16.msra.mxu0 %v9031
  %11616 = vmatprep.subr.bf16.mxu0 0
  %11617 = vmatpush1.bf16.msra.mxu0 0
  %11618 = vmatprep.subr.bf16.mxu0 0
  %11619 = vmatpush1.bf16.msra.mxu0 0
  %11620 = vmatprep.subr.bf16.mxu0 0
  %11621 = vmatpush1.bf16.msra.mxu0 0
  %11622 = vmatprep.subr.bf16.mxu0 0
  %11623 = vmatpush1.bf16.msra.mxu0 0
  %11624 = vmatprep.subr.bf16.mxu0 0
  %11625 = vmatpush1.bf16.msra.mxu0 0
  %11626 = vmatprep.subr.bf16.mxu0 0
  %11627 = vmatpush1.bf16.msra.mxu0 0
  %11628 = vmatprep.subr.bf16.mxu0 0
  %11629 = vmatpush1.bf16.msra.mxu0 0
  %11630 = vmatprep.subr.bf16.mxu0 0
  %11631 = vmatpush1.bf16.msra.mxu0 0
  %11632 = vmatprep.subr.bf16.mxu0 0
  %11633 = vmatpush1.bf16.msra.mxu0 0
  %11634 = vmatprep.mubr.bf16.mxu0 0
  %11635 = vmatmul.mubr.bf16.gmra.mrb[0].mxu0 %v11597
  %v11636 = vpop.f32.mrb[0].mxu0
  %v11637 = vadd.f32 0.0, %v11636
  %v11638 = vpop.f32.mrb[0].mxu0
  %v11639 = vpop.f32.mrb[0].mxu0
  %v11640 = vadd.f32 0.0, %v11639
  %v11641 = vpop.f32.mrb[0].mxu0
  %11642 = vmatprep.mubr.bf16.mxu0 0
  %11643 = vmatmul.mubr.bf16.gmra.mrb[0].mxu0 %v11600
  %v11644 = vpop.f32.mrb[0].mxu0
  %v11645 = vadd.f32 0.0, %v11644
  %v11646 = vpop.f32.mrb[0].mxu0
  %v11647 = vpop.f32.mrb[0].mxu0
  %v11648 = vpop.f32.mrb[0].mxu0
  %11649 = vdwg.mxu0
  %v11650 = vpack.c.bf16 %v11640, %v11637
  %v11651 = vpack.c.bf16 %v11645, %v11645
  %s11652 = scalar_lea.vmem %s7, 896
  %v11653 = vld [vmem:[%s11652] sm:$0xf]
  %v11654 = vld [vmem:[%s11652 + $0x4] sm:$0xf]
  %v11655 = vld [vmem:[%s11652 + $0x8] sm:$0xf]
  %v11656 = vld [vmem:[%s11652 + $0xc] sm:$0xf]
  %v11657 = vld [vmem:[%s11652 + $0x10] sm:$0xf]
  %v11658 = vld [vmem:[%s11652 + $0x14] sm:$0xf]
  %v11659 = vld [vmem:[%s11652 + $0x18] sm:$0xf]
  %v11660 = vld [vmem:[%s11652 + $0x1c] sm:$0xf]
  %v11661 = vld [vmem:[%s11652 + $0x20] sm:$0xf]
  %v11662 = vld [vmem:[%s11652 + $0x24] sm:$0xf]
  %v11663 = vld [vmem:[%s11652 + $0x28] sm:$0xf]
  %v11664 = vld [vmem:[%s11652 + $0x2c] sm:$0xf]
  %v11665 = vld [vmem:[%s11652 + $0x30] sm:$0xf]
  %v11666 = vld [vmem:[%s11652 + $0x34] sm:$0xf]
  %v11667 = vld [vmem:[%s11652 + $0x38] sm:$0xf]
  %v11668 = vld [vmem:[%s11652 + $0x3c] sm:$0xf]
  %v11685 = vunpack.c.l.b16 %v11653
  %v11686 = vunpack.c.l.b16 %v11654
  %v11687 = vunpack.c.l.b16 %v11655
  %v11688 = vunpack.c.l.b16 %v11656
  %v11689 = vunpack.c.l.b16 %v11657
  %v11690 = vunpack.c.l.b16 %v11658
  %v11691 = vunpack.c.l.b16 %v11659
  %v11692 = vunpack.c.l.b16 %v11660
  %v11693 = vunpack.c.l.b16 %v11661
  %v11694 = vunpack.c.l.b16 %v11662
  %v11695 = vunpack.c.l.b16 %v11663
  %v11696 = vunpack.c.l.b16 %v11664
  %v11697 = vunpack.c.l.b16 %v11665
  %v11698 = vunpack.c.l.b16 %v11666
  %v11699 = vunpack.c.l.b16 %v11667
  %v11700 = vunpack.c.l.b16 %v11668
  %v11701 = vpack.c.b16 %v11686, %v11685
  %v11702 = vpack.c.b16 %v11688, %v11687
  %v11703 = vpack.c.b16 %v11690, %v11689
  %v11704 = vpack.c.b16 %v11692, %v11691
  %v11705 = vpack.c.b16 %v11694, %v11693
  %v11706 = vpack.c.b16 %v11696, %v11695
  %v11707 = vpack.c.b16 %v11698, %v11697
  %v11708 = vpack.c.b16 %v11700, %v11699
  %11717 = vmatprep.subr.bf16.mxu0 0
  %11718 = vmatpush1.bf16.msra.mxu0 %v11701
  %11719 = vmatprep.subr.bf16.mxu0 0
  %11720 = vmatpush1.bf16.msra.mxu0 %v11702
  %11721 = vmatprep.subr.bf16.mxu0 0
  %11722 = vmatpush1.bf16.msra.mxu0 %v11703
  %11723 = vmatprep.subr.bf16.mxu0 0
  %11724 = vmatpush1.bf16.msra.mxu0 %v11704
  %11725 = vmatprep.subr.bf16.mxu0 0
  %11726 = vmatpush1.bf16.msra.mxu0 %v11705
  %11727 = vmatprep.subr.bf16.mxu0 0
  %11728 = vmatpush1.bf16.msra.mxu0 %v11706
  %11729 = vmatprep.subr.bf16.mxu0 0
  %11730 = vmatpush1.bf16.msra.mxu0 %v11707
  %11731 = vmatprep.subr.bf16.mxu0 0
  %11732 = vmatpush1.bf16.msra.mxu0 %v11708
  %11733 = vmatprep.subr.bf16.mxu0 0
  %11734 = vmatpush1.bf16.msra.mxu0 0
  %11735 = vmatprep.subr.bf16.mxu0 0
  %11736 = vmatpush1.bf16.msra.mxu0 0
  %11737 = vmatprep.subr.bf16.mxu0 0
  %11738 = vmatpush1.bf16.msra.mxu0 0
  %11739 = vmatprep.subr.bf16.mxu0 0
  %11740 = vmatpush1.bf16.msra.mxu0 0
  %11741 = vmatprep.subr.bf16.mxu0 0
  %11742 = vmatpush1.bf16.msra.mxu0 0
  %11743 = vmatprep.subr.bf16.mxu0 0
  %11744 = vmatpush1.bf16.msra.mxu0 0
  %11745 = vmatprep.subr.bf16.mxu0 0
  %11746 = vmatpush1.bf16.msra.mxu0 0
  %11747 = vmatprep.subr.bf16.mxu0 0
  %11748 = vmatpush1.bf16.msra.mxu0 0
  %11749 = vmatprep.mubr.bf16.mxu0 0
  %11750 = vmatmul.mubr.bf16.gmra.mrb[0].mxu0 %v11650
  %v11751 = vpop.f32.mrb[0].mxu0
  %v11752 = vadd.f32 0.0, %v11751
  %v11753 = vpop.f32.mrb[0].mxu0
  %v11754 = vpop.f32.mrb[0].mxu0
  %v11755 = vadd.f32 0.0, %v11754
  %v11756 = vpop.f32.mrb[0].mxu0
  %11757 = vmatprep.mubr.bf16.mxu0 0
  %11758 = vmatmul.mubr.bf16.gmra.mrb[0].mxu0 %v11651
  %v11759 = vpop.f32.mrb[0].mxu0
  %v11760 = vadd.f32 0.0, %v11759
  %v11761 = vpop.f32.mrb[0].mxu0
  %v11762 = vpop.f32.mrb[0].mxu0
  %v11763 = vpop.f32.mrb[0].mxu0
  %11764 = vdwg.mxu0
  %v11765 = vadd.f32 %v11581, %v11752
  %v11766 = vadd.f32 %v11582, %v11755
  %v11767 = vadd.f32 %v11583, %v11760
  %s11768 = scalar_lea.vmem %s6, 180
  %v11769 = vld [vmem:[%s11768] sm:$0xf]
  %v11770 = vld [vmem:[%s11768 + $0x4] sm:$0xf]
  %v11771 = vld [vmem:[%s11768 + $0x8] sm:$0xf]
  %v11775 = vunpack.c.l.b16 %v11769
  %v11776 = vunpack.c.l.b16 %v11770
  %v11777 = vunpack.c.l.b16 %v11771
  %v11778 = vpack.c.b16 %v11776, %v11775
  %v11779 = vpack.c.b16 %v11777, %v11777
  %v11781 = vsel %vm9023, %v11778, 0
  %v11784 = vsel %vm9023, %v11779, 0
  %11786 = vmatprep.subr.bf16.mxu0 0
  %11787 = vmatpush1.bf16.msra.mxu0 %v9005
  %11788 = vmatprep.subr.bf16.mxu0 0
  %11789 = vmatpush1.bf16.msra.mxu0 %v9006
  %11790 = vmatprep.subr.bf16.mxu0 0
  %11791 = vmatpush1.bf16.msra.mxu0 %v9007
  %11792 = vmatprep.subr.bf16.mxu0 0
  %11793 = vmatpush1.bf16.msra.mxu0 %v9008
  %11794 = vmatprep.subr.bf16.mxu0 0
  %11795 = vmatpush1.bf16.msra.mxu0 %v9009
  %11796 = vmatprep.subr.bf16.mxu0 0
  %11797 = vmatpush1.bf16.msra.mxu0 %v9010
  %11798 = vmatprep.subr.bf16.mxu0 0
  %11799 = vmatpush1.bf16.msra.mxu0 %v9031
  %11800 = vmatprep.subr.bf16.mxu0 0
  %11801 = vmatpush1.bf16.msra.mxu0 0
  %11802 = vmatprep.subr.bf16.mxu0 0
  %11803 = vmatpush1.bf16.msra.mxu0 0
  %11804 = vmatprep.subr.bf16.mxu0 0
  %11805 = vmatpush1.bf16.msra.mxu0 0
  %11806 = vmatprep.subr.bf16.mxu0 0
  %11807 = vmatpush1.bf16.msra.mxu0 0
  %11808 = vmatprep.subr.bf16.mxu0 0
  %11809 = vmatpush1.bf16.msra.mxu0 0
  %11810 = vmatprep.subr.bf16.mxu0 0
  %11811 = vmatpush1.bf16.msra.mxu0 0
  %11812 = vmatprep.subr.bf16.mxu0 0
  %11813 = vmatpush1.bf16.msra.mxu0 0
  %11814 = vmatprep.subr.bf16.mxu0 0
  %11815 = vmatpush1.bf16.msra.mxu0 0
  %11816 = vmatprep.subr.bf16.mxu0 0
  %11817 = vmatpush1.bf16.msra.mxu0 0
  %11818 = vmatprep.mubr.bf16.mxu0 0
  %11819 = vmatmul.mubr.bf16.gmra.mrb[0].mxu0 %v11781
  %v11820 = vpop.f32.mrb[0].mxu0
  %v11821 = vadd.f32 0.0, %v11820
  %v11822 = vpop.f32.mrb[0].mxu0
  %v11823 = vpop.f32.mrb[0].mxu0
  %v11824 = vadd.f32 0.0, %v11823
  %v11825 = vpop.f32.mrb[0].mxu0
  %11826 = vmatprep.mubr.bf16.mxu0 0
  %11827 = vmatmul.mubr.bf16.gmra.mrb[0].mxu0 %v11784
  %v11828 = vpop.f32.mrb[0].mxu0
  %v11829 = vadd.f32 0.0, %v11828
  %v11830 = vpop.f32.mrb[0].mxu0
  %v11831 = vpop.f32.mrb[0].mxu0
  %v11832 = vpop.f32.mrb[0].mxu0
  %11833 = vdwg.mxu0
  %v11834 = vpack.c.bf16 %v11824, %v11821
  %v11835 = vpack.c.bf16 %v11829, %v11829
  %s11836 = scalar_lea.vmem %s7, 960
  %v11837 = vld [vmem:[%s11836] sm:$0xf]
  %v11838 = vld [vmem:[%s11836 + $0x4] sm:$0xf]
  %v11839 = vld [vmem:[%s11836 + $0x8] sm:$0xf]
  %v11840 = vld [vmem:[%s11836 + $0xc] sm:$0xf]
  %v11841 = vld [vmem:[%s11836 + $0x10] sm:$0xf]
  %v11842 = vld [vmem:[%s11836 + $0x14] sm:$0xf]
  %v11843 = vld [vmem:[%s11836 + $0x18] sm:$0xf]
  %v11844 = vld [vmem:[%s11836 + $0x1c] sm:$0xf]
  %v11845 = vld [vmem:[%s11836 + $0x20] sm:$0xf]
  %v11846 = vld [vmem:[%s11836 + $0x24] sm:$0xf]
  %v11847 = vld [vmem:[%s11836 + $0x28] sm:$0xf]
  %v11848 = vld [vmem:[%s11836 + $0x2c] sm:$0xf]
  %v11849 = vld [vmem:[%s11836 + $0x30] sm:$0xf]
  %v11850 = vld [vmem:[%s11836 + $0x34] sm:$0xf]
  %v11851 = vld [vmem:[%s11836 + $0x38] sm:$0xf]
  %v11852 = vld [vmem:[%s11836 + $0x3c] sm:$0xf]
  %v11869 = vunpack.c.l.b16 %v11837
  %v11870 = vunpack.c.l.b16 %v11838
  %v11871 = vunpack.c.l.b16 %v11839
  %v11872 = vunpack.c.l.b16 %v11840
  %v11873 = vunpack.c.l.b16 %v11841
  %v11874 = vunpack.c.l.b16 %v11842
  %v11875 = vunpack.c.l.b16 %v11843
  %v11876 = vunpack.c.l.b16 %v11844
  %v11877 = vunpack.c.l.b16 %v11845
  %v11878 = vunpack.c.l.b16 %v11846
  %v11879 = vunpack.c.l.b16 %v11847
  %v11880 = vunpack.c.l.b16 %v11848
  %v11881 = vunpack.c.l.b16 %v11849
  %v11882 = vunpack.c.l.b16 %v11850
  %v11883 = vunpack.c.l.b16 %v11851
  %v11884 = vunpack.c.l.b16 %v11852
  %v11885 = vpack.c.b16 %v11870, %v11869
  %v11886 = vpack.c.b16 %v11872, %v11871
  %v11887 = vpack.c.b16 %v11874, %v11873
  %v11888 = vpack.c.b16 %v11876, %v11875
  %v11889 = vpack.c.b16 %v11878, %v11877
  %v11890 = vpack.c.b16 %v11880, %v11879
  %v11891 = vpack.c.b16 %v11882, %v11881
  %v11892 = vpack.c.b16 %v11884, %v11883
  %11901 = vmatprep.subr.bf16.mxu0 0
  %11902 = vmatpush1.bf16.msra.mxu0 %v11885
  %11903 = vmatprep.subr.bf16.mxu0 0
  %11904 = vmatpush1.bf16.msra.mxu0 %v11886
  %11905 = vmatprep.subr.bf16.mxu0 0
  %11906 = vmatpush1.bf16.msra.mxu0 %v11887
  %11907 = vmatprep.subr.bf16.mxu0 0
  %11908 = vmatpush1.bf16.msra.mxu0 %v11888
  %11909 = vmatprep.subr.bf16.mxu0 0
  %11910 = vmatpush1.bf16.msra.mxu0 %v11889
  %11911 = vmatprep.subr.bf16.mxu0 0
  %11912 = vmatpush1.bf16.msra.mxu0 %v11890
  %11913 = vmatprep.subr.bf16.mxu0 0
  %11914 = vmatpush1.bf16.msra.mxu0 %v11891
  %11915 = vmatprep.subr.bf16.mxu0 0
  %11916 = vmatpush1.bf16.msra.mxu0 %v11892
  %11917 = vmatprep.subr.bf16.mxu0 0
  %11918 = vmatpush1.bf16.msra.mxu0 0
  %11919 = vmatprep.subr.bf16.mxu0 0
  %11920 = vmatpush1.bf16.msra.mxu0 0
  %11921 = vmatprep.subr.bf16.mxu0 0
  %11922 = vmatpush1.bf16.msra.mxu0 0
  %11923 = vmatprep.subr.bf16.mxu0 0
  %11924 = vmatpush1.bf16.msra.mxu0 0
  %11925 = vmatprep.subr.bf16.mxu0 0
  %11926 = vmatpush1.bf16.msra.mxu0 0
  %11927 = vmatprep.subr.bf16.mxu0 0
  %11928 = vmatpush1.bf16.msra.mxu0 0
  %11929 = vmatprep.subr.bf16.mxu0 0
  %11930 = vmatpush1.bf16.msra.mxu0 0
  %11931 = vmatprep.subr.bf16.mxu0 0
  %11932 = vmatpush1.bf16.msra.mxu0 0
  %11933 = vmatprep.mubr.bf16.mxu0 0
  %11934 = vmatmul.mubr.bf16.gmra.mrb[0].mxu0 %v11834
  %v11935 = vpop.f32.mrb[0].mxu0
  %v11936 = vadd.f32 0.0, %v11935
  %v11937 = vpop.f32.mrb[0].mxu0
  %v11938 = vpop.f32.mrb[0].mxu0
  %v11939 = vadd.f32 0.0, %v11938
  %v11940 = vpop.f32.mrb[0].mxu0
  %11941 = vmatprep.mubr.bf16.mxu0 0
  %11942 = vmatmul.mubr.bf16.gmra.mrb[0].mxu0 %v11835
  %v11943 = vpop.f32.mrb[0].mxu0
  %v11944 = vadd.f32 0.0, %v11943
  %v11945 = vpop.f32.mrb[0].mxu0
  %v11946 = vpop.f32.mrb[0].mxu0
  %v11947 = vpop.f32.mrb[0].mxu0
  %11948 = vdwg.mxu0
  %v11949 = vadd.f32 %v11765, %v11936
  %v11950 = vadd.f32 %v11766, %v11939
  %v11951 = vadd.f32 %v11767, %v11944
  %v11952 = vld [vmem:[%s8] sm:$0x1]
  %v11954 = vlaneseq
  %v11955 = vshrl.u32 %v11954, 7
  %v11956 = vsub.s32 0, %v11955
  %v11957 = vrot.slane %v11952, %v11956
  %v11959 = vadd.f32 %v11949, %v11957
  %v11960 = vadd.f32 %v11950, %v11957
  %v11961 = vadd.f32 %v11951, %v11957
  %v11962 = vmax.f32 %v11959, 0.0
  %v11963 = vmax.f32 %v11960, 0.0
  %v11964 = vmax.f32 %v11961, 0.0
  %v11965 = vpack.c.bf16 %v11963, %v11962
  %v11966 = vpack.c.bf16 %v11964, %v11964
  %v11967 = vld [vmem:[%s9] sm:$0xf]
  %vm11968 = vcmask 195584
  %v11970 = vsel %vm11968, %v11967, 0
  %v11973 = vsel %vm786, %v11966, 0
  %11975 = vmatprep.subr.bf16.mxu0 0
  %11976 = vmatpush1.bf16.msra.mxu0 %v11965
  %11977 = vmatprep.subr.bf16.mxu0 0
  %11978 = vmatpush1.bf16.msra.mxu0 %v11973
  %11979 = vmatprep.subr.bf16.mxu0 0
  %11980 = vmatpush1.bf16.msra.mxu0 0
  %11981 = vmatprep.subr.bf16.mxu0 0
  %11982 = vmatpush1.bf16.msra.mxu0 0
  %11983 = vmatprep.subr.bf16.mxu0 0
  %11984 = vmatpush1.bf16.msra.mxu0 0
  %11985 = vmatprep.subr.bf16.mxu0 0
  %11986 = vmatpush1.bf16.msra.mxu0 0
  %11987 = vmatprep.subr.bf16.mxu0 0
  %11988 = vmatpush1.bf16.msra.mxu0 0
  %11989 = vmatprep.subr.bf16.mxu0 0
  %11990 = vmatpush1.bf16.msra.mxu0 0
  %11991 = vmatprep.subr.bf16.mxu0 0
  %11992 = vmatpush1.bf16.msra.mxu0 0
  %11993 = vmatprep.subr.bf16.mxu0 0
  %11994 = vmatpush1.bf16.msra.mxu0 0
  %11995 = vmatprep.subr.bf16.mxu0 0
  %11996 = vmatpush1.bf16.msra.mxu0 0
  %11997 = vmatprep.subr.bf16.mxu0 0
  %11998 = vmatpush1.bf16.msra.mxu0 0
  %11999 = vmatprep.subr.bf16.mxu0 0
  %12000 = vmatpush1.bf16.msra.mxu0 0
  %12001 = vmatprep.subr.bf16.mxu0 0
  %12002 = vmatpush1.bf16.msra.mxu0 0
  %12003 = vmatprep.subr.bf16.mxu0 0
  %12004 = vmatpush1.bf16.msra.mxu0 0
  %12005 = vmatprep.subr.bf16.mxu0 0
  %12006 = vmatpush1.bf16.msra.mxu0 0
  %12007 = vmatprep.mubr.bf16.mxu0 0
  %12008 = vmatmul.mubr.bf16.gmra.mrb[0].mxu0 %v11970
  %v12009 = vpop.f32.mrb[0].mxu0
  %v12010 = vadd.f32 0.0, %v12009
  %v12011 = vpop.f32.mrb[0].mxu0
  %v12012 = vpop.f32.mrb[0].mxu0
  %v12013 = vpop.f32.mrb[0].mxu0
  %12014 = vdwg.mxu0
  %v12015 = vpack.c.bf16 %v12010, %v12010
  %v12016 = vld [vmem:[%s10] sm:$0xf]
  %v12017 = vld [vmem:[%s10 + $0x4] sm:$0xf]
  %v12018 = vld [vmem:[%s10 + $0x8] sm:$0xf]
  %v12019 = vld [vmem:[%s10 + $0xc] sm:$0xf]
  %v12020 = vld [vmem:[%s10 + $0x10] sm:$0xf]
  %v12021 = vld [vmem:[%s10 + $0x14] sm:$0xf]
  %v12022 = vld [vmem:[%s10 + $0x18] sm:$0xf]
  %v12023 = vld [vmem:[%s10 + $0x1c] sm:$0xf]
  %v12024 = vld [vmem:[%s10 + $0x20] sm:$0xf]
  %v12025 = vld [vmem:[%s10 + $0x24] sm:$0xf]
  %v12026 = vld [vmem:[%s10 + $0x28] sm:$0xf]
  %v12027 = vld [vmem:[%s10 + $0x2c] sm:$0xf]
  %v12028 = vld [vmem:[%s10 + $0x30] sm:$0xf]
  %v12029 = vld [vmem:[%s10 + $0x34] sm:$0xf]
  %v12030 = vld [vmem:[%s10 + $0x38] sm:$0xf]
  %v12031 = vld [vmem:[%s10 + $0x3c] sm:$0xf]
  %s12032 = scalar_lea.vmem %s9, 4
  %v12033 = vld [vmem:[%s12032] sm:$0xf]
  %v12035 = vsel %vm11968, %v12033, 0
  %12037 = vmatprep.subr.bf16.mxu0 0
  %12038 = vmatpush1.bf16.msra.mxu0 %v11965
  %12039 = vmatprep.subr.bf16.mxu0 0
  %12040 = vmatpush1.bf16.msra.mxu0 %v11973
  %12041 = vmatprep.subr.bf16.mxu0 0
  %12042 = vmatpush1.bf16.msra.mxu0 0
  %12043 = vmatprep.subr.bf16.mxu0 0
  %12044 = vmatpush1.bf16.msra.mxu0 0
  %12045 = vmatprep.subr.bf16.mxu0 0
  %12046 = vmatpush1.bf16.msra.mxu0 0
  %12047 = vmatprep.subr.bf16.mxu0 0
  %12048 = vmatpush1.bf16.msra.mxu0 0
  %12049 = vmatprep.subr.bf16.mxu0 0
  %12050 = vmatpush1.bf16.msra.mxu0 0
  %12051 = vmatprep.subr.bf16.mxu0 0
  %12052 = vmatpush1.bf16.msra.mxu0 0
  %12053 = vmatprep.subr.bf16.mxu0 0
  %12054 = vmatpush1.bf16.msra.mxu0 0
  %12055 = vmatprep.subr.bf16.mxu0 0
  %12056 = vmatpush1.bf16.msra.mxu0 0
  %12057 = vmatprep.subr.bf16.mxu0 0
  %12058 = vmatpush1.bf16.msra.mxu0 0
  %12059 = vmatprep.subr.bf16.mxu0 0
  %12060 = vmatpush1.bf16.msra.mxu0 0
  %12061 = vmatprep.subr.bf16.mxu0 0
  %12062 = vmatpush1.bf16.msra.mxu0 0
  %12063 = vmatprep.subr.bf16.mxu0 0
  %12064 = vmatpush1.bf16.msra.mxu0 0
  %12065 = vmatprep.subr.bf16.mxu0 0
  %12066 = vmatpush1.bf16.msra.mxu0 0
  %12067 = vmatprep.subr.bf16.mxu0 0
  %12068 = vmatpush1.bf16.msra.mxu0 0
  %12069 = vmatprep.mubr.bf16.mxu0 0
  %12070 = vmatmul.mubr.bf16.gmra.mrb[0].mxu0 %v12035
  %v12071 = vpop.f32.mrb[0].mxu0
  %v12072 = vadd.f32 0.0, %v12071
  %v12073 = vpop.f32.mrb[0].mxu0
  %v12074 = vpop.f32.mrb[0].mxu0
  %v12075 = vpop.f32.mrb[0].mxu0
  %12076 = vdwg.mxu0
  %v12077 = vpack.c.bf16 %v12072, %v12072
  %s12078 = scalar_lea.vmem %s10, 64
  %v12079 = vld [vmem:[%s12078] sm:$0xf]
  %v12080 = vld [vmem:[%s12078 + $0x4] sm:$0xf]
  %v12081 = vld [vmem:[%s12078 + $0x8] sm:$0xf]
  %v12082 = vld [vmem:[%s12078 + $0xc] sm:$0xf]
  %v12083 = vld [vmem:[%s12078 + $0x10] sm:$0xf]
  %v12084 = vld [vmem:[%s12078 + $0x14] sm:$0xf]
  %v12085 = vld [vmem:[%s12078 + $0x18] sm:$0xf]
  %v12086 = vld [vmem:[%s12078 + $0x1c] sm:$0xf]
  %v12087 = vld [vmem:[%s12078 + $0x20] sm:$0xf]
  %v12088 = vld [vmem:[%s12078 + $0x24] sm:$0xf]
  %v12089 = vld [vmem:[%s12078 + $0x28] sm:$0xf]
  %v12090 = vld [vmem:[%s12078 + $0x2c] sm:$0xf]
  %v12091 = vld [vmem:[%s12078 + $0x30] sm:$0xf]
  %v12092 = vld [vmem:[%s12078 + $0x34] sm:$0xf]
  %v12093 = vld [vmem:[%s12078 + $0x38] sm:$0xf]
  %v12094 = vld [vmem:[%s12078 + $0x3c] sm:$0xf]
  %v12111 = vunpack.c.l.b16 %v12079
  %v12112 = vunpack.c.l.b16 %v12080
  %v12113 = vunpack.c.l.b16 %v12081
  %v12114 = vunpack.c.l.b16 %v12082
  %v12115 = vunpack.c.l.b16 %v12083
  %v12116 = vunpack.c.l.b16 %v12084
  %v12117 = vunpack.c.l.b16 %v12085
  %v12118 = vunpack.c.l.b16 %v12086
  %v12119 = vunpack.c.l.b16 %v12087
  %v12120 = vunpack.c.l.b16 %v12088
  %v12121 = vunpack.c.l.b16 %v12089
  %v12122 = vunpack.c.l.b16 %v12090
  %v12123 = vunpack.c.l.b16 %v12091
  %v12124 = vunpack.c.l.b16 %v12092
  %v12125 = vunpack.c.l.b16 %v12093
  %v12126 = vunpack.c.l.b16 %v12094
  %v12127 = vpack.c.b16 %v12112, %v12111
  %v12128 = vpack.c.b16 %v12114, %v12113
  %v12129 = vpack.c.b16 %v12116, %v12115
  %v12130 = vpack.c.b16 %v12118, %v12117
  %v12131 = vpack.c.b16 %v12120, %v12119
  %v12132 = vpack.c.b16 %v12122, %v12121
  %v12133 = vpack.c.b16 %v12124, %v12123
  %v12134 = vpack.c.b16 %v12126, %v12125
  %12143 = vmatprep.subr.bf16.mxu0 0
  %12144 = vmatpush1.bf16.msra.mxu0 %v12127
  %12145 = vmatprep.subr.bf16.mxu0 0
  %12146 = vmatpush1.bf16.msra.mxu0 %v12128
  %12147 = vmatprep.subr.bf16.mxu0 0
  %12148 = vmatpush1.bf16.msra.mxu0 %v12129
  %12149 = vmatprep.subr.bf16.mxu0 0
  %12150 = vmatpush1.bf16.msra.mxu0 %v12130
  %12151 = vmatprep.subr.bf16.mxu0 0
  %12152 = vmatpush1.bf16.msra.mxu0 %v12131
  %12153 = vmatprep.subr.bf16.mxu0 0
  %12154 = vmatpush1.bf16.msra.mxu0 %v12132
  %12155 = vmatprep.subr.bf16.mxu0 0
  %12156 = vmatpush1.bf16.msra.mxu0 %v12133
  %12157 = vmatprep.subr.bf16.mxu0 0
  %12158 = vmatpush1.bf16.msra.mxu0 %v12134
  %12159 = vmatprep.subr.bf16.mxu0 0
  %12160 = vmatpush1.bf16.msra.mxu0 0
  %12161 = vmatprep.subr.bf16.mxu0 0
  %12162 = vmatpush1.bf16.msra.mxu0 0
  %12163 = vmatprep.subr.bf16.mxu0 0
  %12164 = vmatpush1.bf16.msra.mxu0 0
  %12165 = vmatprep.subr.bf16.mxu0 0
  %12166 = vmatpush1.bf16.msra.mxu0 0
  %12167 = vmatprep.subr.bf16.mxu0 0
  %12168 = vmatpush1.bf16.msra.mxu0 0
  %12169 = vmatprep.subr.bf16.mxu0 0
  %12170 = vmatpush1.bf16.msra.mxu0 0
  %12171 = vmatprep.subr.bf16.mxu0 0
  %12172 = vmatpush1.bf16.msra.mxu0 0
  %12173 = vmatprep.subr.bf16.mxu0 0
  %12174 = vmatpush1.bf16.msra.mxu0 0
  %12175 = vmatprep.mubr.bf16.mxu0 0
  %12176 = vmatmul.mubr.bf16.gmra.mrb[0].mxu0 %v12077
  %v12177 = vpop.f32.mrb[0].mxu0
  %v12178 = vadd.f32 0.0, %v12177
  %v12179 = vpop.f32.mrb[0].mxu0
  %v12180 = vpop.f32.mrb[0].mxu0
  %v12181 = vpop.f32.mrb[0].mxu0
  %12182 = vdwg.mxu0
  %v12199 = vunpack.c.l.b16 %v12016
  %v12200 = vunpack.c.l.b16 %v12017
  %v12201 = vunpack.c.l.b16 %v12018
  %v12202 = vunpack.c.l.b16 %v12019
  %v12203 = vunpack.c.l.b16 %v12020
  %v12204 = vunpack.c.l.b16 %v12021
  %v12205 = vunpack.c.l.b16 %v12022
  %v12206 = vunpack.c.l.b16 %v12023
  %v12207 = vunpack.c.l.b16 %v12024
  %v12208 = vunpack.c.l.b16 %v12025
  %v12209 = vunpack.c.l.b16 %v12026
  %v12210 = vunpack.c.l.b16 %v12027
  %v12211 = vunpack.c.l.b16 %v12028
  %v12212 = vunpack.c.l.b16 %v12029
  %v12213 = vunpack.c.l.b16 %v12030
  %v12214 = vunpack.c.l.b16 %v12031
  %v12215 = vpack.c.b16 %v12200, %v12199
  %v12216 = vpack.c.b16 %v12202, %v12201
  %v12217 = vpack.c.b16 %v12204, %v12203
  %v12218 = vpack.c.b16 %v12206, %v12205
  %v12219 = vpack.c.b16 %v12208, %v12207
  %v12220 = vpack.c.b16 %v12210, %v12209
  %v12221 = vpack.c.b16 %v12212, %v12211
  %v12222 = vpack.c.b16 %v12214, %v12213
  %12231 = vmatprep.subr.bf16.mxu0 0
  %12232 = vmatpush1.bf16.msra.mxu0 %v12215
  %12233 = vmatprep.subr.bf16.mxu0 0
  %12234 = vmatpush1.bf16.msra.mxu0 %v12216
  %12235 = vmatprep.subr.bf16.mxu0 0
  %12236 = vmatpush1.bf16.msra.mxu0 %v12217
  %12237 = vmatprep.subr.bf16.mxu0 0
  %12238 = vmatpush1.bf16.msra.mxu0 %v12218
  %12239 = vmatprep.subr.bf16.mxu0 0
  %12240 = vmatpush1.bf16.msra.mxu0 %v12219
  %12241 = vmatprep.subr.bf16.mxu0 0
  %12242 = vmatpush1.bf16.msra.mxu0 %v12220
  %12243 = vmatprep.subr.bf16.mxu0 0
  %12244 = vmatpush1.bf16.msra.mxu0 %v12221
  %12245 = vmatprep.subr.bf16.mxu0 0
  %12246 = vmatpush1.bf16.msra.mxu0 %v12222
  %12247 = vmatprep.subr.bf16.mxu0 0
  %12248 = vmatpush1.bf16.msra.mxu0 0
  %12249 = vmatprep.subr.bf16.mxu0 0
  %12250 = vmatpush1.bf16.msra.mxu0 0
  %12251 = vmatprep.subr.bf16.mxu0 0
  %12252 = vmatpush1.bf16.msra.mxu0 0
  %12253 = vmatprep.subr.bf16.mxu0 0
  %12254 = vmatpush1.bf16.msra.mxu0 0
  %12255 = vmatprep.subr.bf16.mxu0 0
  %12256 = vmatpush1.bf16.msra.mxu0 0
  %12257 = vmatprep.subr.bf16.mxu0 0
  %12258 = vmatpush1.bf16.msra.mxu0 0
  %12259 = vmatprep.subr.bf16.mxu0 0
  %12260 = vmatpush1.bf16.msra.mxu0 0
  %12261 = vmatprep.subr.bf16.mxu0 0
  %12262 = vmatpush1.bf16.msra.mxu0 0
  %12263 = vmatprep.mubr.bf16.mxu0 0
  %12264 = vmatmul.mubr.bf16.gmra.mrb[0].mxu0 %v12015
  %v12265 = vpop.f32.mrb[0].mxu0
  %v12266 = vadd.f32 %v12178, %v12265
  %v12267 = vpop.f32.mrb[0].mxu0
  %v12268 = vpop.f32.mrb[0].mxu0
  %v12269 = vpop.f32.mrb[0].mxu0
  %12270 = vdwg.mxu0
  %s12271 = scalar_lea.vmem %s9, 8
  %v12272 = vld [vmem:[%s12271] sm:$0xf]
  %v12274 = vsel %vm11968, %v12272, 0
  %12276 = vmatprep.subr.bf16.mxu0 0
  %12277 = vmatpush1.bf16.msra.mxu0 %v11965
  %12278 = vmatprep.subr.bf16.mxu0 0
  %12279 = vmatpush1.bf16.msra.mxu0 %v11973
  %12280 = vmatprep.subr.bf16.mxu0 0
  %12281 = vmatpush1.bf16.msra.mxu0 0
  %12282 = vmatprep.subr.bf16.mxu0 0
  %12283 = vmatpush1.bf16.msra.mxu0 0
  %12284 = vmatprep.subr.bf16.mxu0 0
  %12285 = vmatpush1.bf16.msra.mxu0 0
  %12286 = vmatprep.subr.bf16.mxu0 0
  %12287 = vmatpush1.bf16.msra.mxu0 0
  %12288 = vmatprep.subr.bf16.mxu0 0
  %12289 = vmatpush1.bf16.msra.mxu0 0
  %12290 = vmatprep.subr.bf16.mxu0 0
  %12291 = vmatpush1.bf16.msra.mxu0 0
  %12292 = vmatprep.subr.bf16.mxu0 0
  %12293 = vmatpush1.bf16.msra.mxu0 0
  %12294 = vmatprep.subr.bf16.mxu0 0
  %12295 = vmatpush1.bf16.msra.mxu0 0
  %12296 = vmatprep.subr.bf16.mxu0 0
  %12297 = vmatpush1.bf16.msra.mxu0 0
  %12298 = vmatprep.subr.bf16.mxu0 0
  %12299 = vmatpush1.bf16.msra.mxu0 0
  %12300 = vmatprep.subr.bf16.mxu0 0
  %12301 = vmatpush1.bf16.msra.mxu0 0
  %12302 = vmatprep.subr.bf16.mxu0 0
  %12303 = vmatpush1.bf16.msra.mxu0 0
  %12304 = vmatprep.subr.bf16.mxu0 0
  %12305 = vmatpush1.bf16.msra.mxu0 0
  %12306 = vmatprep.subr.bf16.mxu0 0
  %12307 = vmatpush1.bf16.msra.mxu0 0
  %12308 = vmatprep.mubr.bf16.mxu0 0
  %12309 = vmatmul.mubr.bf16.gmra.mrb[0].mxu0 %v12274
  %v12310 = vpop.f32.mrb[0].mxu0
  %v12311 = vadd.f32 0.0, %v12310
  %v12312 = vpop.f32.mrb[0].mxu0
  %v12313 = vpop.f32.mrb[0].mxu0
  %v12314 = vpop.f32.mrb[0].mxu0
  %12315 = vdwg.mxu0
  %v12316 = vpack.c.bf16 %v12311, %v12311
  %s12317 = scalar_lea.vmem %s10, 128
  %v12318 = vld [vmem:[%s12317] sm:$0xf]
  %v12319 = vld [vmem:[%s12317 + $0x4] sm:$0xf]
  %v12320 = vld [vmem:[%s12317 + $0x8] sm:$0xf]
  %v12321 = vld [vmem:[%s12317 + $0xc] sm:$0xf]
  %v12322 = vld [vmem:[%s12317 + $0x10] sm:$0xf]
  %v12323 = vld [vmem:[%s12317 + $0x14] sm:$0xf]
  %v12324 = vld [vmem:[%s12317 + $0x18] sm:$0xf]
  %v12325 = vld [vmem:[%s12317 + $0x1c] sm:$0xf]
  %v12326 = vld [vmem:[%s12317 + $0x20] sm:$0xf]
  %v12327 = vld [vmem:[%s12317 + $0x24] sm:$0xf]
  %v12328 = vld [vmem:[%s12317 + $0x28] sm:$0xf]
  %v12329 = vld [vmem:[%s12317 + $0x2c] sm:$0xf]
  %v12330 = vld [vmem:[%s12317 + $0x30] sm:$0xf]
  %v12331 = vld [vmem:[%s12317 + $0x34] sm:$0xf]
  %v12332 = vld [vmem:[%s12317 + $0x38] sm:$0xf]
  %v12333 = vld [vmem:[%s12317 + $0x3c] sm:$0xf]
  %v12350 = vunpack.c.l.b16 %v12318
  %v12351 = vunpack.c.l.b16 %v12319
  %v12352 = vunpack.c.l.b16 %v12320
  %v12353 = vunpack.c.l.b16 %v12321
  %v12354 = vunpack.c.l.b16 %v12322
  %v12355 = vunpack.c.l.b16 %v12323
  %v12356 = vunpack.c.l.b16 %v12324
  %v12357 = vunpack.c.l.b16 %v12325
  %v12358 = vunpack.c.l.b16 %v12326
  %v12359 = vunpack.c.l.b16 %v12327
  %v12360 = vunpack.c.l.b16 %v12328
  %v12361 = vunpack.c.l.b16 %v12329
  %v12362 = vunpack.c.l.b16 %v12330
  %v12363 = vunpack.c.l.b16 %v12331
  %v12364 = vunpack.c.l.b16 %v12332
  %v12365 = vunpack.c.l.b16 %v12333
  %v12366 = vpack.c.b16 %v12351, %v12350
  %v12367 = vpack.c.b16 %v12353, %v12352
  %v12368 = vpack.c.b16 %v12355, %v12354
  %v12369 = vpack.c.b16 %v12357, %v12356
  %v12370 = vpack.c.b16 %v12359, %v12358
  %v12371 = vpack.c.b16 %v12361, %v12360
  %v12372 = vpack.c.b16 %v12363, %v12362
  %v12373 = vpack.c.b16 %v12365, %v12364
  %12382 = vmatprep.subr.bf16.mxu0 0
  %12383 = vmatpush1.bf16.msra.mxu0 %v12366
  %12384 = vmatprep.subr.bf16.mxu0 0
  %12385 = vmatpush1.bf16.msra.mxu0 %v12367
  %12386 = vmatprep.subr.bf16.mxu0 0
  %12387 = vmatpush1.bf16.msra.mxu0 %v12368
  %12388 = vmatprep.subr.bf16.mxu0 0
  %12389 = vmatpush1.bf16.msra.mxu0 %v12369
  %12390 = vmatprep.subr.bf16.mxu0 0
  %12391 = vmatpush1.bf16.msra.mxu0 %v12370
  %12392 = vmatprep.subr.bf16.mxu0 0
  %12393 = vmatpush1.bf16.msra.mxu0 %v12371
  %12394 = vmatprep.subr.bf16.mxu0 0
  %12395 = vmatpush1.bf16.msra.mxu0 %v12372
  %12396 = vmatprep.subr.bf16.mxu0 0
  %12397 = vmatpush1.bf16.msra.mxu0 %v12373
  %12398 = vmatprep.subr.bf16.mxu0 0
  %12399 = vmatpush1.bf16.msra.mxu0 0
  %12400 = vmatprep.subr.bf16.mxu0 0
  %12401 = vmatpush1.bf16.msra.mxu0 0
  %12402 = vmatprep.subr.bf16.mxu0 0
  %12403 = vmatpush1.bf16.msra.mxu0 0
  %12404 = vmatprep.subr.bf16.mxu0 0
  %12405 = vmatpush1.bf16.msra.mxu0 0
  %12406 = vmatprep.subr.bf16.mxu0 0
  %12407 = vmatpush1.bf16.msra.mxu0 0
  %12408 = vmatprep.subr.bf16.mxu0 0
  %12409 = vmatpush1.bf16.msra.mxu0 0
  %12410 = vmatprep.subr.bf16.mxu0 0
  %12411 = vmatpush1.bf16.msra.mxu0 0
  %12412 = vmatprep.subr.bf16.mxu0 0
  %12413 = vmatpush1.bf16.msra.mxu0 0
  %12414 = vmatprep.mubr.bf16.mxu0 0
  %12415 = vmatmul.mubr.bf16.gmra.mrb[0].mxu0 %v12316
  %v12416 = vpop.f32.mrb[0].mxu0
  %v12417 = vadd.f32 0.0, %v12416
  %v12418 = vpop.f32.mrb[0].mxu0
  %v12419 = vpop.f32.mrb[0].mxu0
  %v12420 = vpop.f32.mrb[0].mxu0
  %12421 = vdwg.mxu0
  %v12422 = vadd.f32 %v12266, %v12417
  %s12423 = scalar_lea.vmem %s9, 12
  %v12424 = vld [vmem:[%s12423] sm:$0xf]
  %v12426 = vsel %vm11968, %v12424, 0
  %12428 = vmatprep.subr.bf16.mxu0 0
  %12429 = vmatpush1.bf16.msra.mxu0 %v11965
  %12430 = vmatprep.subr.bf16.mxu0 0
  %12431 = vmatpush1.bf16.msra.mxu0 %v11973
  %12432 = vmatprep.subr.bf16.mxu0 0
  %12433 = vmatpush1.bf16.msra.mxu0 0
  %12434 = vmatprep.subr.bf16.mxu0 0
  %12435 = vmatpush1.bf16.msra.mxu0 0
  %12436 = vmatprep.subr.bf16.mxu0 0
  %12437 = vmatpush1.bf16.msra.mxu0 0
  %12438 = vmatprep.subr.bf16.mxu0 0
  %12439 = vmatpush1.bf16.msra.mxu0 0
  %12440 = vmatprep.subr.bf16.mxu0 0
  %12441 = vmatpush1.bf16.msra.mxu0 0
  %12442 = vmatprep.subr.bf16.mxu0 0
  %12443 = vmatpush1.bf16.msra.mxu0 0
  %12444 = vmatprep.subr.bf16.mxu0 0
  %12445 = vmatpush1.bf16.msra.mxu0 0
  %12446 = vmatprep.subr.bf16.mxu0 0
  %12447 = vmatpush1.bf16.msra.mxu0 0
  %12448 = vmatprep.subr.bf16.mxu0 0
  %12449 = vmatpush1.bf16.msra.mxu0 0
  %12450 = vmatprep.subr.bf16.mxu0 0
  %12451 = vmatpush1.bf16.msra.mxu0 0
  %12452 = vmatprep.subr.bf16.mxu0 0
  %12453 = vmatpush1.bf16.msra.mxu0 0
  %12454 = vmatprep.subr.bf16.mxu0 0
  %12455 = vmatpush1.bf16.msra.mxu0 0
  %12456 = vmatprep.subr.bf16.mxu0 0
  %12457 = vmatpush1.bf16.msra.mxu0 0
  %12458 = vmatprep.subr.bf16.mxu0 0
  %12459 = vmatpush1.bf16.msra.mxu0 0
  %12460 = vmatprep.mubr.bf16.mxu0 0
  %12461 = vmatmul.mubr.bf16.gmra.mrb[0].mxu0 %v12426
  %v12462 = vpop.f32.mrb[0].mxu0
  %v12463 = vadd.f32 0.0, %v12462
  %v12464 = vpop.f32.mrb[0].mxu0
  %v12465 = vpop.f32.mrb[0].mxu0
  %v12466 = vpop.f32.mrb[0].mxu0
  %12467 = vdwg.mxu0
  %v12468 = vpack.c.bf16 %v12463, %v12463
  %s12469 = scalar_lea.vmem %s10, 192
  %v12470 = vld [vmem:[%s12469] sm:$0xf]
  %v12471 = vld [vmem:[%s12469 + $0x4] sm:$0xf]
  %v12472 = vld [vmem:[%s12469 + $0x8] sm:$0xf]
  %v12473 = vld [vmem:[%s12469 + $0xc] sm:$0xf]
  %v12474 = vld [vmem:[%s12469 + $0x10] sm:$0xf]
  %v12475 = vld [vmem:[%s12469 + $0x14] sm:$0xf]
  %v12476 = vld [vmem:[%s12469 + $0x18] sm:$0xf]
  %v12477 = vld [vmem:[%s12469 + $0x1c] sm:$0xf]
  %v12478 = vld [vmem:[%s12469 + $0x20] sm:$0xf]
  %v12479 = vld [vmem:[%s12469 + $0x24] sm:$0xf]
  %v12480 = vld [vmem:[%s12469 + $0x28] sm:$0xf]
  %v12481 = vld [vmem:[%s12469 + $0x2c] sm:$0xf]
  %v12482 = vld [vmem:[%s12469 + $0x30] sm:$0xf]
  %v12483 = vld [vmem:[%s12469 + $0x34] sm:$0xf]
  %v12484 = vld [vmem:[%s12469 + $0x38] sm:$0xf]
  %v12485 = vld [vmem:[%s12469 + $0x3c] sm:$0xf]
  %v12502 = vunpack.c.l.b16 %v12470
  %v12503 = vunpack.c.l.b16 %v12471
  %v12504 = vunpack.c.l.b16 %v12472
  %v12505 = vunpack.c.l.b16 %v12473
  %v12506 = vunpack.c.l.b16 %v12474
  %v12507 = vunpack.c.l.b16 %v12475
  %v12508 = vunpack.c.l.b16 %v12476
  %v12509 = vunpack.c.l.b16 %v12477
  %v12510 = vunpack.c.l.b16 %v12478
  %v12511 = vunpack.c.l.b16 %v12479
  %v12512 = vunpack.c.l.b16 %v12480
  %v12513 = vunpack.c.l.b16 %v12481
  %v12514 = vunpack.c.l.b16 %v12482
  %v12515 = vunpack.c.l.b16 %v12483
  %v12516 = vunpack.c.l.b16 %v12484
  %v12517 = vunpack.c.l.b16 %v12485
  %v12518 = vpack.c.b16 %v12503, %v12502
  %v12519 = vpack.c.b16 %v12505, %v12504
  %v12520 = vpack.c.b16 %v12507, %v12506
  %v12521 = vpack.c.b16 %v12509, %v12508
  %v12522 = vpack.c.b16 %v12511, %v12510
  %v12523 = vpack.c.b16 %v12513, %v12512
  %v12524 = vpack.c.b16 %v12515, %v12514
  %v12525 = vpack.c.b16 %v12517, %v12516
  %12534 = vmatprep.subr.bf16.mxu0 0
  %12535 = vmatpush1.bf16.msra.mxu0 %v12518
  %12536 = vmatprep.subr.bf16.mxu0 0
  %12537 = vmatpush1.bf16.msra.mxu0 %v12519
  %12538 = vmatprep.subr.bf16.mxu0 0
  %12539 = vmatpush1.bf16.msra.mxu0 %v12520
  %12540 = vmatprep.subr.bf16.mxu0 0
  %12541 = vmatpush1.bf16.msra.mxu0 %v12521
  %12542 = vmatprep.subr.bf16.mxu0 0
  %12543 = vmatpush1.bf16.msra.mxu0 %v12522
  %12544 = vmatprep.subr.bf16.mxu0 0
  %12545 = vmatpush1.bf16.msra.mxu0 %v12523
  %12546 = vmatprep.subr.bf16.mxu0 0
  %12547 = vmatpush1.bf16.msra.mxu0 %v12524
  %12548 = vmatprep.subr.bf16.mxu0 0
  %12549 = vmatpush1.bf16.msra.mxu0 %v12525
  %12550 = vmatprep.subr.bf16.mxu0 0
  %12551 = vmatpush1.bf16.msra.mxu0 0
  %12552 = vmatprep.subr.bf16.mxu0 0
  %12553 = vmatpush1.bf16.msra.mxu0 0
  %12554 = vmatprep.subr.bf16.mxu0 0
  %12555 = vmatpush1.bf16.msra.mxu0 0
  %12556 = vmatprep.subr.bf16.mxu0 0
  %12557 = vmatpush1.bf16.msra.mxu0 0
  %12558 = vmatprep.subr.bf16.mxu0 0
  %12559 = vmatpush1.bf16.msra.mxu0 0
  %12560 = vmatprep.subr.bf16.mxu0 0
  %12561 = vmatpush1.bf16.msra.mxu0 0
  %12562 = vmatprep.subr.bf16.mxu0 0
  %12563 = vmatpush1.bf16.msra.mxu0 0
  %12564 = vmatprep.subr.bf16.mxu0 0
  %12565 = vmatpush1.bf16.msra.mxu0 0
  %12566 = vmatprep.mubr.bf16.mxu0 0
  %12567 = vmatmul.mubr.bf16.gmra.mrb[0].mxu0 %v12468
  %v12568 = vpop.f32.mrb[0].mxu0
  %v12569 = vadd.f32 0.0, %v12568
  %v12570 = vpop.f32.mrb[0].mxu0
  %v12571 = vpop.f32.mrb[0].mxu0
  %v12572 = vpop.f32.mrb[0].mxu0
  %12573 = vdwg.mxu0
  %v12574 = vadd.f32 %v12422, %v12569
  %s12575 = scalar_lea.vmem %s9, 16
  %v12576 = vld [vmem:[%s12575] sm:$0xf]
  %v12578 = vsel %vm11968, %v12576, 0
  %12580 = vmatprep.subr.bf16.mxu0 0
  %12581 = vmatpush1.bf16.msra.mxu0 %v11965
  %12582 = vmatprep.subr.bf16.mxu0 0
  %12583 = vmatpush1.bf16.msra.mxu0 %v11973
  %12584 = vmatprep.subr.bf16.mxu0 0
  %12585 = vmatpush1.bf16.msra.mxu0 0
  %12586 = vmatprep.subr.bf16.mxu0 0
  %12587 = vmatpush1.bf16.msra.mxu0 0
  %12588 = vmatprep.subr.bf16.mxu0 0
  %12589 = vmatpush1.bf16.msra.mxu0 0
  %12590 = vmatprep.subr.bf16.mxu0 0
  %12591 = vmatpush1.bf16.msra.mxu0 0
  %12592 = vmatprep.subr.bf16.mxu0 0
  %12593 = vmatpush1.bf16.msra.mxu0 0
  %12594 = vmatprep.subr.bf16.mxu0 0
  %12595 = vmatpush1.bf16.msra.mxu0 0
  %12596 = vmatprep.subr.bf16.mxu0 0
  %12597 = vmatpush1.bf16.msra.mxu0 0
  %12598 = vmatprep.subr.bf16.mxu0 0
  %12599 = vmatpush1.bf16.msra.mxu0 0
  %12600 = vmatprep.subr.bf16.mxu0 0
  %12601 = vmatpush1.bf16.msra.mxu0 0
  %12602 = vmatprep.subr.bf16.mxu0 0
  %12603 = vmatpush1.bf16.msra.mxu0 0
  %12604 = vmatprep.subr.bf16.mxu0 0
  %12605 = vmatpush1.bf16.msra.mxu0 0
  %12606 = vmatprep.subr.bf16.mxu0 0
  %12607 = vmatpush1.bf16.msra.mxu0 0
  %12608 = vmatprep.subr.bf16.mxu0 0
  %12609 = vmatpush1.bf16.msra.mxu0 0
  %12610 = vmatprep.subr.bf16.mxu0 0
  %12611 = vmatpush1.bf16.msra.mxu0 0
  %12612 = vmatprep.mubr.bf16.mxu0 0
  %12613 = vmatmul.mubr.bf16.gmra.mrb[0].mxu0 %v12578
  %v12614 = vpop.f32.mrb[0].mxu0
  %v12615 = vadd.f32 0.0, %v12614
  %v12616 = vpop.f32.mrb[0].mxu0
  %v12617 = vpop.f32.mrb[0].mxu0
  %v12618 = vpop.f32.mrb[0].mxu0
  %12619 = vdwg.mxu0
  %v12620 = vpack.c.bf16 %v12615, %v12615
  %s12621 = scalar_lea.vmem %s10, 256
  %v12622 = vld [vmem:[%s12621] sm:$0xf]
  %v12623 = vld [vmem:[%s12621 + $0x4] sm:$0xf]
  %v12624 = vld [vmem:[%s12621 + $0x8] sm:$0xf]
  %v12625 = vld [vmem:[%s12621 + $0xc] sm:$0xf]
  %v12626 = vld [vmem:[%s12621 + $0x10] sm:$0xf]
  %v12627 = vld [vmem:[%s12621 + $0x14] sm:$0xf]
  %v12628 = vld [vmem:[%s12621 + $0x18] sm:$0xf]
  %v12629 = vld [vmem:[%s12621 + $0x1c] sm:$0xf]
  %v12630 = vld [vmem:[%s12621 + $0x20] sm:$0xf]
  %v12631 = vld [vmem:[%s12621 + $0x24] sm:$0xf]
  %v12632 = vld [vmem:[%s12621 + $0x28] sm:$0xf]
  %v12633 = vld [vmem:[%s12621 + $0x2c] sm:$0xf]
  %v12634 = vld [vmem:[%s12621 + $0x30] sm:$0xf]
  %v12635 = vld [vmem:[%s12621 + $0x34] sm:$0xf]
  %v12636 = vld [vmem:[%s12621 + $0x38] sm:$0xf]
  %v12637 = vld [vmem:[%s12621 + $0x3c] sm:$0xf]
  %v12654 = vunpack.c.l.b16 %v12622
  %v12655 = vunpack.c.l.b16 %v12623
  %v12656 = vunpack.c.l.b16 %v12624
  %v12657 = vunpack.c.l.b16 %v12625
  %v12658 = vunpack.c.l.b16 %v12626
  %v12659 = vunpack.c.l.b16 %v12627
  %v12660 = vunpack.c.l.b16 %v12628
  %v12661 = vunpack.c.l.b16 %v12629
  %v12662 = vunpack.c.l.b16 %v12630
  %v12663 = vunpack.c.l.b16 %v12631
  %v12664 = vunpack.c.l.b16 %v12632
  %v12665 = vunpack.c.l.b16 %v12633
  %v12666 = vunpack.c.l.b16 %v12634
  %v12667 = vunpack.c.l.b16 %v12635
  %v12668 = vunpack.c.l.b16 %v12636
  %v12669 = vunpack.c.l.b16 %v12637
  %v12670 = vpack.c.b16 %v12655, %v12654
  %v12671 = vpack.c.b16 %v12657, %v12656
  %v12672 = vpack.c.b16 %v12659, %v12658
  %v12673 = vpack.c.b16 %v12661, %v12660
  %v12674 = vpack.c.b16 %v12663, %v12662
  %v12675 = vpack.c.b16 %v12665, %v12664
  %v12676 = vpack.c.b16 %v12667, %v12666
  %v12677 = vpack.c.b16 %v12669, %v12668
  %12686 = vmatprep.subr.bf16.mxu0 0
  %12687 = vmatpush1.bf16.msra.mxu0 %v12670
  %12688 = vmatprep.subr.bf16.mxu0 0
  %12689 = vmatpush1.bf16.msra.mxu0 %v12671
  %12690 = vmatprep.subr.bf16.mxu0 0
  %12691 = vmatpush1.bf16.msra.mxu0 %v12672
  %12692 = vmatprep.subr.bf16.mxu0 0
  %12693 = vmatpush1.bf16.msra.mxu0 %v12673
  %12694 = vmatprep.subr.bf16.mxu0 0
  %12695 = vmatpush1.bf16.msra.mxu0 %v12674
  %12696 = vmatprep.subr.bf16.mxu0 0
  %12697 = vmatpush1.bf16.msra.mxu0 %v12675
  %12698 = vmatprep.subr.bf16.mxu0 0
  %12699 = vmatpush1.bf16.msra.mxu0 %v12676
  %12700 = vmatprep.subr.bf16.mxu0 0
  %12701 = vmatpush1.bf16.msra.mxu0 %v12677
  %12702 = vmatprep.subr.bf16.mxu0 0
  %12703 = vmatpush1.bf16.msra.mxu0 0
  %12704 = vmatprep.subr.bf16.mxu0 0
  %12705 = vmatpush1.bf16.msra.mxu0 0
  %12706 = vmatprep.subr.bf16.mxu0 0
  %12707 = vmatpush1.bf16.msra.mxu0 0
  %12708 = vmatprep.subr.bf16.mxu0 0
  %12709 = vmatpush1.bf16.msra.mxu0 0
  %12710 = vmatprep.subr.bf16.mxu0 0
  %12711 = vmatpush1.bf16.msra.mxu0 0
  %12712 = vmatprep.subr.bf16.mxu0 0
  %12713 = vmatpush1.bf16.msra.mxu0 0
  %12714 = vmatprep.subr.bf16.mxu0 0
  %12715 = vmatpush1.bf16.msra.mxu0 0
  %12716 = vmatprep.subr.bf16.mxu0 0
  %12717 = vmatpush1.bf16.msra.mxu0 0
  %12718 = vmatprep.mubr.bf16.mxu0 0
  %12719 = vmatmul.mubr.bf16.gmra.mrb[0].mxu0 %v12620
  %v12720 = vpop.f32.mrb[0].mxu0
  %v12721 = vadd.f32 0.0, %v12720
  %v12722 = vpop.f32.mrb[0].mxu0
  %v12723 = vpop.f32.mrb[0].mxu0
  %v12724 = vpop.f32.mrb[0].mxu0
  %12725 = vdwg.mxu0
  %v12726 = vadd.f32 %v12574, %v12721
  %s12727 = scalar_lea.vmem %s9, 20
  %v12728 = vld [vmem:[%s12727] sm:$0xf]
  %v12730 = vsel %vm11968, %v12728, 0
  %12732 = vmatprep.subr.bf16.mxu0 0
  %12733 = vmatpush1.bf16.msra.mxu0 %v11965
  %12734 = vmatprep.subr.bf16.mxu0 0
  %12735 = vmatpush1.bf16.msra.mxu0 %v11973
  %12736 = vmatprep.subr.bf16.mxu0 0
  %12737 = vmatpush1.bf16.msra.mxu0 0
  %12738 = vmatprep.subr.bf16.mxu0 0
  %12739 = vmatpush1.bf16.msra.mxu0 0
  %12740 = vmatprep.subr.bf16.mxu0 0
  %12741 = vmatpush1.bf16.msra.mxu0 0
  %12742 = vmatprep.subr.bf16.mxu0 0
  %12743 = vmatpush1.bf16.msra.mxu0 0
  %12744 = vmatprep.subr.bf16.mxu0 0
  %12745 = vmatpush1.bf16.msra.mxu0 0
  %12746 = vmatprep.subr.bf16.mxu0 0
  %12747 = vmatpush1.bf16.msra.mxu0 0
  %12748 = vmatprep.subr.bf16.mxu0 0
  %12749 = vmatpush1.bf16.msra.mxu0 0
  %12750 = vmatprep.subr.bf16.mxu0 0
  %12751 = vmatpush1.bf16.msra.mxu0 0
  %12752 = vmatprep.subr.bf16.mxu0 0
  %12753 = vmatpush1.bf16.msra.mxu0 0
  %12754 = vmatprep.subr.bf16.mxu0 0
  %12755 = vmatpush1.bf16.msra.mxu0 0
  %12756 = vmatprep.subr.bf16.mxu0 0
  %12757 = vmatpush1.bf16.msra.mxu0 0
  %12758 = vmatprep.subr.bf16.mxu0 0
  %12759 = vmatpush1.bf16.msra.mxu0 0
  %12760 = vmatprep.subr.bf16.mxu0 0
  %12761 = vmatpush1.bf16.msra.mxu0 0
  %12762 = vmatprep.subr.bf16.mxu0 0
  %12763 = vmatpush1.bf16.msra.mxu0 0
  %12764 = vmatprep.mubr.bf16.mxu0 0
  %12765 = vmatmul.mubr.bf16.gmra.mrb[0].mxu0 %v12730
  %v12766 = vpop.f32.mrb[0].mxu0
  %v12767 = vadd.f32 0.0, %v12766
  %v12768 = vpop.f32.mrb[0].mxu0
  %v12769 = vpop.f32.mrb[0].mxu0
  %v12770 = vpop.f32.mrb[0].mxu0
  %12771 = vdwg.mxu0
  %v12772 = vpack.c.bf16 %v12767, %v12767
  %s12773 = scalar_lea.vmem %s10, 320
  %v12774 = vld [vmem:[%s12773] sm:$0xf]
  %v12775 = vld [vmem:[%s12773 + $0x4] sm:$0xf]
  %v12776 = vld [vmem:[%s12773 + $0x8] sm:$0xf]
  %v12777 = vld [vmem:[%s12773 + $0xc] sm:$0xf]
  %v12778 = vld [vmem:[%s12773 + $0x10] sm:$0xf]
  %v12779 = vld [vmem:[%s12773 + $0x14] sm:$0xf]
  %v12780 = vld [vmem:[%s12773 + $0x18] sm:$0xf]
  %v12781 = vld [vmem:[%s12773 + $0x1c] sm:$0xf]
  %v12782 = vld [vmem:[%s12773 + $0x20] sm:$0xf]
  %v12783 = vld [vmem:[%s12773 + $0x24] sm:$0xf]
  %v12784 = vld [vmem:[%s12773 + $0x28] sm:$0xf]
  %v12785 = vld [vmem:[%s12773 + $0x2c] sm:$0xf]
  %v12786 = vld [vmem:[%s12773 + $0x30] sm:$0xf]
  %v12787 = vld [vmem:[%s12773 + $0x34] sm:$0xf]
  %v12788 = vld [vmem:[%s12773 + $0x38] sm:$0xf]
  %v12789 = vld [vmem:[%s12773 + $0x3c] sm:$0xf]
  %v12806 = vunpack.c.l.b16 %v12774
  %v12807 = vunpack.c.l.b16 %v12775
  %v12808 = vunpack.c.l.b16 %v12776
  %v12809 = vunpack.c.l.b16 %v12777
  %v12810 = vunpack.c.l.b16 %v12778
  %v12811 = vunpack.c.l.b16 %v12779
  %v12812 = vunpack.c.l.b16 %v12780
  %v12813 = vunpack.c.l.b16 %v12781
  %v12814 = vunpack.c.l.b16 %v12782
  %v12815 = vunpack.c.l.b16 %v12783
  %v12816 = vunpack.c.l.b16 %v12784
  %v12817 = vunpack.c.l.b16 %v12785
  %v12818 = vunpack.c.l.b16 %v12786
  %v12819 = vunpack.c.l.b16 %v12787
  %v12820 = vunpack.c.l.b16 %v12788
  %v12821 = vunpack.c.l.b16 %v12789
  %v12822 = vpack.c.b16 %v12807, %v12806
  %v12823 = vpack.c.b16 %v12809, %v12808
  %v12824 = vpack.c.b16 %v12811, %v12810
  %v12825 = vpack.c.b16 %v12813, %v12812
  %v12826 = vpack.c.b16 %v12815, %v12814
  %v12827 = vpack.c.b16 %v12817, %v12816
  %v12828 = vpack.c.b16 %v12819, %v12818
  %v12829 = vpack.c.b16 %v12821, %v12820
  %12838 = vmatprep.subr.bf16.mxu0 0
  %12839 = vmatpush1.bf16.msra.mxu0 %v12822
  %12840 = vmatprep.subr.bf16.mxu0 0
  %12841 = vmatpush1.bf16.msra.mxu0 %v12823
  %12842 = vmatprep.subr.bf16.mxu0 0
  %12843 = vmatpush1.bf16.msra.mxu0 %v12824
  %12844 = vmatprep.subr.bf16.mxu0 0
  %12845 = vmatpush1.bf16.msra.mxu0 %v12825
  %12846 = vmatprep.subr.bf16.mxu0 0
  %12847 = vmatpush1.bf16.msra.mxu0 %v12826
  %12848 = vmatprep.subr.bf16.mxu0 0
  %12849 = vmatpush1.bf16.msra.mxu0 %v12827
  %12850 = vmatprep.subr.bf16.mxu0 0
  %12851 = vmatpush1.bf16.msra.mxu0 %v12828
  %12852 = vmatprep.subr.bf16.mxu0 0
  %12853 = vmatpush1.bf16.msra.mxu0 %v12829
  %12854 = vmatprep.subr.bf16.mxu0 0
  %12855 = vmatpush1.bf16.msra.mxu0 0
  %12856 = vmatprep.subr.bf16.mxu0 0
  %12857 = vmatpush1.bf16.msra.mxu0 0
  %12858 = vmatprep.subr.bf16.mxu0 0
  %12859 = vmatpush1.bf16.msra.mxu0 0
  %12860 = vmatprep.subr.bf16.mxu0 0
  %12861 = vmatpush1.bf16.msra.mxu0 0
  %12862 = vmatprep.subr.bf16.mxu0 0
  %12863 = vmatpush1.bf16.msra.mxu0 0
  %12864 = vmatprep.subr.bf16.mxu0 0
  %12865 = vmatpush1.bf16.msra.mxu0 0
  %12866 = vmatprep.subr.bf16.mxu0 0
  %12867 = vmatpush1.bf16.msra.mxu0 0
  %12868 = vmatprep.subr.bf16.mxu0 0
  %12869 = vmatpush1.bf16.msra.mxu0 0
  %12870 = vmatprep.mubr.bf16.mxu0 0
  %12871 = vmatmul.mubr.bf16.gmra.mrb[0].mxu0 %v12772
  %v12872 = vpop.f32.mrb[0].mxu0
  %v12873 = vadd.f32 0.0, %v12872
  %v12874 = vpop.f32.mrb[0].mxu0
  %v12875 = vpop.f32.mrb[0].mxu0
  %v12876 = vpop.f32.mrb[0].mxu0
  %12877 = vdwg.mxu0
  %v12878 = vadd.f32 %v12726, %v12873
  %s12879 = scalar_lea.vmem %s9, 24
  %v12880 = vld [vmem:[%s12879] sm:$0xf]
  %v12882 = vsel %vm11968, %v12880, 0
  %12884 = vmatprep.subr.bf16.mxu0 0
  %12885 = vmatpush1.bf16.msra.mxu0 %v11965
  %12886 = vmatprep.subr.bf16.mxu0 0
  %12887 = vmatpush1.bf16.msra.mxu0 %v11973
  %12888 = vmatprep.subr.bf16.mxu0 0
  %12889 = vmatpush1.bf16.msra.mxu0 0
  %12890 = vmatprep.subr.bf16.mxu0 0
  %12891 = vmatpush1.bf16.msra.mxu0 0
  %12892 = vmatprep.subr.bf16.mxu0 0
  %12893 = vmatpush1.bf16.msra.mxu0 0
  %12894 = vmatprep.subr.bf16.mxu0 0
  %12895 = vmatpush1.bf16.msra.mxu0 0
  %12896 = vmatprep.subr.bf16.mxu0 0
  %12897 = vmatpush1.bf16.msra.mxu0 0
  %12898 = vmatprep.subr.bf16.mxu0 0
  %12899 = vmatpush1.bf16.msra.mxu0 0
  %12900 = vmatprep.subr.bf16.mxu0 0
  %12901 = vmatpush1.bf16.msra.mxu0 0
  %12902 = vmatprep.subr.bf16.mxu0 0
  %12903 = vmatpush1.bf16.msra.mxu0 0
  %12904 = vmatprep.subr.bf16.mxu0 0
  %12905 = vmatpush1.bf16.msra.mxu0 0
  %12906 = vmatprep.subr.bf16.mxu0 0
  %12907 = vmatpush1.bf16.msra.mxu0 0
  %12908 = vmatprep.subr.bf16.mxu0 0
  %12909 = vmatpush1.bf16.msra.mxu0 0
  %12910 = vmatprep.subr.bf16.mxu0 0
  %12911 = vmatpush1.bf16.msra.mxu0 0
  %12912 = vmatprep.subr.bf16.mxu0 0
  %12913 = vmatpush1.bf16.msra.mxu0 0
  %12914 = vmatprep.subr.bf16.mxu0 0
  %12915 = vmatpush1.bf16.msra.mxu0 0
  %12916 = vmatprep.mubr.bf16.mxu0 0
  %12917 = vmatmul.mubr.bf16.gmra.mrb[0].mxu0 %v12882
  %v12918 = vpop.f32.mrb[0].mxu0
  %v12919 = vadd.f32 0.0, %v12918
  %v12920 = vpop.f32.mrb[0].mxu0
  %v12921 = vpop.f32.mrb[0].mxu0
  %v12922 = vpop.f32.mrb[0].mxu0
  %12923 = vdwg.mxu0
  %v12924 = vpack.c.bf16 %v12919, %v12919
  %s12925 = scalar_lea.vmem %s10, 384
  %v12926 = vld [vmem:[%s12925] sm:$0xf]
  %v12927 = vld [vmem:[%s12925 + $0x4] sm:$0xf]
  %v12928 = vld [vmem:[%s12925 + $0x8] sm:$0xf]
  %v12929 = vld [vmem:[%s12925 + $0xc] sm:$0xf]
  %v12930 = vld [vmem:[%s12925 + $0x10] sm:$0xf]
  %v12931 = vld [vmem:[%s12925 + $0x14] sm:$0xf]
  %v12932 = vld [vmem:[%s12925 + $0x18] sm:$0xf]
  %v12933 = vld [vmem:[%s12925 + $0x1c] sm:$0xf]
  %v12934 = vld [vmem:[%s12925 + $0x20] sm:$0xf]
  %v12935 = vld [vmem:[%s12925 + $0x24] sm:$0xf]
  %v12936 = vld [vmem:[%s12925 + $0x28] sm:$0xf]
  %v12937 = vld [vmem:[%s12925 + $0x2c] sm:$0xf]
  %v12938 = vld [vmem:[%s12925 + $0x30] sm:$0xf]
  %v12939 = vld [vmem:[%s12925 + $0x34] sm:$0xf]
  %v12940 = vld [vmem:[%s12925 + $0x38] sm:$0xf]
  %v12941 = vld [vmem:[%s12925 + $0x3c] sm:$0xf]
  %v12958 = vunpack.c.l.b16 %v12926
  %v12959 = vunpack.c.l.b16 %v12927
  %v12960 = vunpack.c.l.b16 %v12928
  %v12961 = vunpack.c.l.b16 %v12929
  %v12962 = vunpack.c.l.b16 %v12930
  %v12963 = vunpack.c.l.b16 %v12931
  %v12964 = vunpack.c.l.b16 %v12932
  %v12965 = vunpack.c.l.b16 %v12933
  %v12966 = vunpack.c.l.b16 %v12934
  %v12967 = vunpack.c.l.b16 %v12935
  %v12968 = vunpack.c.l.b16 %v12936
  %v12969 = vunpack.c.l.b16 %v12937
  %v12970 = vunpack.c.l.b16 %v12938
  %v12971 = vunpack.c.l.b16 %v12939
  %v12972 = vunpack.c.l.b16 %v12940
  %v12973 = vunpack.c.l.b16 %v12941
  %v12974 = vpack.c.b16 %v12959, %v12958
  %v12975 = vpack.c.b16 %v12961, %v12960
  %v12976 = vpack.c.b16 %v12963, %v12962
  %v12977 = vpack.c.b16 %v12965, %v12964
  %v12978 = vpack.c.b16 %v12967, %v12966
  %v12979 = vpack.c.b16 %v12969, %v12968
  %v12980 = vpack.c.b16 %v12971, %v12970
  %v12981 = vpack.c.b16 %v12973, %v12972
  %12990 = vmatprep.subr.bf16.mxu0 0
  %12991 = vmatpush1.bf16.msra.mxu0 %v12974
  %12992 = vmatprep.subr.bf16.mxu0 0
  %12993 = vmatpush1.bf16.msra.mxu0 %v12975
  %12994 = vmatprep.subr.bf16.mxu0 0
  %12995 = vmatpush1.bf16.msra.mxu0 %v12976
  %12996 = vmatprep.subr.bf16.mxu0 0
  %12997 = vmatpush1.bf16.msra.mxu0 %v12977
  %12998 = vmatprep.subr.bf16.mxu0 0
  %12999 = vmatpush1.bf16.msra.mxu0 %v12978
  %13000 = vmatprep.subr.bf16.mxu0 0
  %13001 = vmatpush1.bf16.msra.mxu0 %v12979
  %13002 = vmatprep.subr.bf16.mxu0 0
  %13003 = vmatpush1.bf16.msra.mxu0 %v12980
  %13004 = vmatprep.subr.bf16.mxu0 0
  %13005 = vmatpush1.bf16.msra.mxu0 %v12981
  %13006 = vmatprep.subr.bf16.mxu0 0
  %13007 = vmatpush1.bf16.msra.mxu0 0
  %13008 = vmatprep.subr.bf16.mxu0 0
  %13009 = vmatpush1.bf16.msra.mxu0 0
  %13010 = vmatprep.subr.bf16.mxu0 0
  %13011 = vmatpush1.bf16.msra.mxu0 0
  %13012 = vmatprep.subr.bf16.mxu0 0
  %13013 = vmatpush1.bf16.msra.mxu0 0
  %13014 = vmatprep.subr.bf16.mxu0 0
  %13015 = vmatpush1.bf16.msra.mxu0 0
  %13016 = vmatprep.subr.bf16.mxu0 0
  %13017 = vmatpush1.bf16.msra.mxu0 0
  %13018 = vmatprep.subr.bf16.mxu0 0
  %13019 = vmatpush1.bf16.msra.mxu0 0
  %13020 = vmatprep.subr.bf16.mxu0 0
  %13021 = vmatpush1.bf16.msra.mxu0 0
  %13022 = vmatprep.mubr.bf16.mxu0 0
  %13023 = vmatmul.mubr.bf16.gmra.mrb[0].mxu0 %v12924
  %v13024 = vpop.f32.mrb[0].mxu0
  %v13025 = vadd.f32 0.0, %v13024
  %v13026 = vpop.f32.mrb[0].mxu0
  %v13027 = vpop.f32.mrb[0].mxu0
  %v13028 = vpop.f32.mrb[0].mxu0
  %13029 = vdwg.mxu0
  %v13030 = vadd.f32 %v12878, %v13025
  %s13031 = scalar_lea.vmem %s9, 28
  %v13032 = vld [vmem:[%s13031] sm:$0xf]
  %v13034 = vsel %vm11968, %v13032, 0
  %13036 = vmatprep.subr.bf16.mxu0 0
  %13037 = vmatpush1.bf16.msra.mxu0 %v11965
  %13038 = vmatprep.subr.bf16.mxu0 0
  %13039 = vmatpush1.bf16.msra.mxu0 %v11973
  %13040 = vmatprep.subr.bf16.mxu0 0
  %13041 = vmatpush1.bf16.msra.mxu0 0
  %13042 = vmatprep.subr.bf16.mxu0 0
  %13043 = vmatpush1.bf16.msra.mxu0 0
  %13044 = vmatprep.subr.bf16.mxu0 0
  %13045 = vmatpush1.bf16.msra.mxu0 0
  %13046 = vmatprep.subr.bf16.mxu0 0
  %13047 = vmatpush1.bf16.msra.mxu0 0
  %13048 = vmatprep.subr.bf16.mxu0 0
  %13049 = vmatpush1.bf16.msra.mxu0 0
  %13050 = vmatprep.subr.bf16.mxu0 0
  %13051 = vmatpush1.bf16.msra.mxu0 0
  %13052 = vmatprep.subr.bf16.mxu0 0
  %13053 = vmatpush1.bf16.msra.mxu0 0
  %13054 = vmatprep.subr.bf16.mxu0 0
  %13055 = vmatpush1.bf16.msra.mxu0 0
  %13056 = vmatprep.subr.bf16.mxu0 0
  %13057 = vmatpush1.bf16.msra.mxu0 0
  %13058 = vmatprep.subr.bf16.mxu0 0
  %13059 = vmatpush1.bf16.msra.mxu0 0
  %13060 = vmatprep.subr.bf16.mxu0 0
  %13061 = vmatpush1.bf16.msra.mxu0 0
  %13062 = vmatprep.subr.bf16.mxu0 0
  %13063 = vmatpush1.bf16.msra.mxu0 0
  %13064 = vmatprep.subr.bf16.mxu0 0
  %13065 = vmatpush1.bf16.msra.mxu0 0
  %13066 = vmatprep.subr.bf16.mxu0 0
  %13067 = vmatpush1.bf16.msra.mxu0 0
  %13068 = vmatprep.mubr.bf16.mxu0 0
  %13069 = vmatmul.mubr.bf16.gmra.mrb[0].mxu0 %v13034
  %v13070 = vpop.f32.mrb[0].mxu0
  %v13071 = vadd.f32 0.0, %v13070
  %v13072 = vpop.f32.mrb[0].mxu0
  %v13073 = vpop.f32.mrb[0].mxu0
  %v13074 = vpop.f32.mrb[0].mxu0
  %13075 = vdwg.mxu0
  %v13076 = vpack.c.bf16 %v13071, %v13071
  %s13077 = scalar_lea.vmem %s10, 448
  %v13078 = vld [vmem:[%s13077] sm:$0xf]
  %v13079 = vld [vmem:[%s13077 + $0x4] sm:$0xf]
  %v13080 = vld [vmem:[%s13077 + $0x8] sm:$0xf]
  %v13081 = vld [vmem:[%s13077 + $0xc] sm:$0xf]
  %v13082 = vld [vmem:[%s13077 + $0x10] sm:$0xf]
  %v13083 = vld [vmem:[%s13077 + $0x14] sm:$0xf]
  %v13084 = vld [vmem:[%s13077 + $0x18] sm:$0xf]
  %v13085 = vld [vmem:[%s13077 + $0x1c] sm:$0xf]
  %v13086 = vld [vmem:[%s13077 + $0x20] sm:$0xf]
  %v13087 = vld [vmem:[%s13077 + $0x24] sm:$0xf]
  %v13088 = vld [vmem:[%s13077 + $0x28] sm:$0xf]
  %v13089 = vld [vmem:[%s13077 + $0x2c] sm:$0xf]
  %v13090 = vld [vmem:[%s13077 + $0x30] sm:$0xf]
  %v13091 = vld [vmem:[%s13077 + $0x34] sm:$0xf]
  %v13092 = vld [vmem:[%s13077 + $0x38] sm:$0xf]
  %v13093 = vld [vmem:[%s13077 + $0x3c] sm:$0xf]
  %v13110 = vunpack.c.l.b16 %v13078
  %v13111 = vunpack.c.l.b16 %v13079
  %v13112 = vunpack.c.l.b16 %v13080
  %v13113 = vunpack.c.l.b16 %v13081
  %v13114 = vunpack.c.l.b16 %v13082
  %v13115 = vunpack.c.l.b16 %v13083
  %v13116 = vunpack.c.l.b16 %v13084
  %v13117 = vunpack.c.l.b16 %v13085
  %v13118 = vunpack.c.l.b16 %v13086
  %v13119 = vunpack.c.l.b16 %v13087
  %v13120 = vunpack.c.l.b16 %v13088
  %v13121 = vunpack.c.l.b16 %v13089
  %v13122 = vunpack.c.l.b16 %v13090
  %v13123 = vunpack.c.l.b16 %v13091
  %v13124 = vunpack.c.l.b16 %v13092
  %v13125 = vunpack.c.l.b16 %v13093
  %v13126 = vpack.c.b16 %v13111, %v13110
  %v13127 = vpack.c.b16 %v13113, %v13112
  %v13128 = vpack.c.b16 %v13115, %v13114
  %v13129 = vpack.c.b16 %v13117, %v13116
  %v13130 = vpack.c.b16 %v13119, %v13118
  %v13131 = vpack.c.b16 %v13121, %v13120
  %v13132 = vpack.c.b16 %v13123, %v13122
  %v13133 = vpack.c.b16 %v13125, %v13124
  %13142 = vmatprep.subr.bf16.mxu0 0
  %13143 = vmatpush1.bf16.msra.mxu0 %v13126
  %13144 = vmatprep.subr.bf16.mxu0 0
  %13145 = vmatpush1.bf16.msra.mxu0 %v13127
  %13146 = vmatprep.subr.bf16.mxu0 0
  %13147 = vmatpush1.bf16.msra.mxu0 %v13128
  %13148 = vmatprep.subr.bf16.mxu0 0
  %13149 = vmatpush1.bf16.msra.mxu0 %v13129
  %13150 = vmatprep.subr.bf16.mxu0 0
  %13151 = vmatpush1.bf16.msra.mxu0 %v13130
  %13152 = vmatprep.subr.bf16.mxu0 0
  %13153 = vmatpush1.bf16.msra.mxu0 %v13131
  %13154 = vmatprep.subr.bf16.mxu0 0
  %13155 = vmatpush1.bf16.msra.mxu0 %v13132
  %13156 = vmatprep.subr.bf16.mxu0 0
  %13157 = vmatpush1.bf16.msra.mxu0 %v13133
  %13158 = vmatprep.subr.bf16.mxu0 0
  %13159 = vmatpush1.bf16.msra.mxu0 0
  %13160 = vmatprep.subr.bf16.mxu0 0
  %13161 = vmatpush1.bf16.msra.mxu0 0
  %13162 = vmatprep.subr.bf16.mxu0 0
  %13163 = vmatpush1.bf16.msra.mxu0 0
  %13164 = vmatprep.subr.bf16.mxu0 0
  %13165 = vmatpush1.bf16.msra.mxu0 0
  %13166 = vmatprep.subr.bf16.mxu0 0
  %13167 = vmatpush1.bf16.msra.mxu0 0
  %13168 = vmatprep.subr.bf16.mxu0 0
  %13169 = vmatpush1.bf16.msra.mxu0 0
  %13170 = vmatprep.subr.bf16.mxu0 0
  %13171 = vmatpush1.bf16.msra.mxu0 0
  %13172 = vmatprep.subr.bf16.mxu0 0
  %13173 = vmatpush1.bf16.msra.mxu0 0
  %13174 = vmatprep.mubr.bf16.mxu0 0
  %13175 = vmatmul.mubr.bf16.gmra.mrb[0].mxu0 %v13076
  %v13176 = vpop.f32.mrb[0].mxu0
  %v13177 = vadd.f32 0.0, %v13176
  %v13178 = vpop.f32.mrb[0].mxu0
  %v13179 = vpop.f32.mrb[0].mxu0
  %v13180 = vpop.f32.mrb[0].mxu0
  %13181 = vdwg.mxu0
  %v13182 = vadd.f32 %v13030, %v13177
  %s13183 = scalar_lea.vmem %s9, 32
  %v13184 = vld [vmem:[%s13183] sm:$0xf]
  %v13186 = vsel %vm11968, %v13184, 0
  %13188 = vmatprep.subr.bf16.mxu0 0
  %13189 = vmatpush1.bf16.msra.mxu0 %v11965
  %13190 = vmatprep.subr.bf16.mxu0 0
  %13191 = vmatpush1.bf16.msra.mxu0 %v11973
  %13192 = vmatprep.subr.bf16.mxu0 0
  %13193 = vmatpush1.bf16.msra.mxu0 0
  %13194 = vmatprep.subr.bf16.mxu0 0
  %13195 = vmatpush1.bf16.msra.mxu0 0
  %13196 = vmatprep.subr.bf16.mxu0 0
  %13197 = vmatpush1.bf16.msra.mxu0 0
  %13198 = vmatprep.subr.bf16.mxu0 0
  %13199 = vmatpush1.bf16.msra.mxu0 0
  %13200 = vmatprep.subr.bf16.mxu0 0
  %13201 = vmatpush1.bf16.msra.mxu0 0
  %13202 = vmatprep.subr.bf16.mxu0 0
  %13203 = vmatpush1.bf16.msra.mxu0 0
  %13204 = vmatprep.subr.bf16.mxu0 0
  %13205 = vmatpush1.bf16.msra.mxu0 0
  %13206 = vmatprep.subr.bf16.mxu0 0
  %13207 = vmatpush1.bf16.msra.mxu0 0
  %13208 = vmatprep.subr.bf16.mxu0 0
  %13209 = vmatpush1.bf16.msra.mxu0 0
  %13210 = vmatprep.subr.bf16.mxu0 0
  %13211 = vmatpush1.bf16.msra.mxu0 0
  %13212 = vmatprep.subr.bf16.mxu0 0
  %13213 = vmatpush1.bf16.msra.mxu0 0
  %13214 = vmatprep.subr.bf16.mxu0 0
  %13215 = vmatpush1.bf16.msra.mxu0 0
  %13216 = vmatprep.subr.bf16.mxu0 0
  %13217 = vmatpush1.bf16.msra.mxu0 0
  %13218 = vmatprep.subr.bf16.mxu0 0
  %13219 = vmatpush1.bf16.msra.mxu0 0
  %13220 = vmatprep.mubr.bf16.mxu0 0
  %13221 = vmatmul.mubr.bf16.gmra.mrb[0].mxu0 %v13186
  %v13222 = vpop.f32.mrb[0].mxu0
  %v13223 = vadd.f32 0.0, %v13222
  %v13224 = vpop.f32.mrb[0].mxu0
  %v13225 = vpop.f32.mrb[0].mxu0
  %v13226 = vpop.f32.mrb[0].mxu0
  %13227 = vdwg.mxu0
  %v13228 = vpack.c.bf16 %v13223, %v13223
  %s13229 = scalar_lea.vmem %s10, 512
  %v13230 = vld [vmem:[%s13229] sm:$0xf]
  %v13231 = vld [vmem:[%s13229 + $0x4] sm:$0xf]
  %v13232 = vld [vmem:[%s13229 + $0x8] sm:$0xf]
  %v13233 = vld [vmem:[%s13229 + $0xc] sm:$0xf]
  %v13234 = vld [vmem:[%s13229 + $0x10] sm:$0xf]
  %v13235 = vld [vmem:[%s13229 + $0x14] sm:$0xf]
  %v13236 = vld [vmem:[%s13229 + $0x18] sm:$0xf]
  %v13237 = vld [vmem:[%s13229 + $0x1c] sm:$0xf]
  %v13238 = vld [vmem:[%s13229 + $0x20] sm:$0xf]
  %v13239 = vld [vmem:[%s13229 + $0x24] sm:$0xf]
  %v13240 = vld [vmem:[%s13229 + $0x28] sm:$0xf]
  %v13241 = vld [vmem:[%s13229 + $0x2c] sm:$0xf]
  %v13242 = vld [vmem:[%s13229 + $0x30] sm:$0xf]
  %v13243 = vld [vmem:[%s13229 + $0x34] sm:$0xf]
  %v13244 = vld [vmem:[%s13229 + $0x38] sm:$0xf]
  %v13245 = vld [vmem:[%s13229 + $0x3c] sm:$0xf]
  %v13262 = vunpack.c.l.b16 %v13230
  %v13263 = vunpack.c.l.b16 %v13231
  %v13264 = vunpack.c.l.b16 %v13232
  %v13265 = vunpack.c.l.b16 %v13233
  %v13266 = vunpack.c.l.b16 %v13234
  %v13267 = vunpack.c.l.b16 %v13235
  %v13268 = vunpack.c.l.b16 %v13236
  %v13269 = vunpack.c.l.b16 %v13237
  %v13270 = vunpack.c.l.b16 %v13238
  %v13271 = vunpack.c.l.b16 %v13239
  %v13272 = vunpack.c.l.b16 %v13240
  %v13273 = vunpack.c.l.b16 %v13241
  %v13274 = vunpack.c.l.b16 %v13242
  %v13275 = vunpack.c.l.b16 %v13243
  %v13276 = vunpack.c.l.b16 %v13244
  %v13277 = vunpack.c.l.b16 %v13245
  %v13278 = vpack.c.b16 %v13263, %v13262
  %v13279 = vpack.c.b16 %v13265, %v13264
  %v13280 = vpack.c.b16 %v13267, %v13266
  %v13281 = vpack.c.b16 %v13269, %v13268
  %v13282 = vpack.c.b16 %v13271, %v13270
  %v13283 = vpack.c.b16 %v13273, %v13272
  %v13284 = vpack.c.b16 %v13275, %v13274
  %v13285 = vpack.c.b16 %v13277, %v13276
  %13294 = vmatprep.subr.bf16.mxu0 0
  %13295 = vmatpush1.bf16.msra.mxu0 %v13278
  %13296 = vmatprep.subr.bf16.mxu0 0
  %13297 = vmatpush1.bf16.msra.mxu0 %v13279
  %13298 = vmatprep.subr.bf16.mxu0 0
  %13299 = vmatpush1.bf16.msra.mxu0 %v13280
  %13300 = vmatprep.subr.bf16.mxu0 0
  %13301 = vmatpush1.bf16.msra.mxu0 %v13281
  %13302 = vmatprep.subr.bf16.mxu0 0
  %13303 = vmatpush1.bf16.msra.mxu0 %v13282
  %13304 = vmatprep.subr.bf16.mxu0 0
  %13305 = vmatpush1.bf16.msra.mxu0 %v13283
  %13306 = vmatprep.subr.bf16.mxu0 0
  %13307 = vmatpush1.bf16.msra.mxu0 %v13284
  %13308 = vmatprep.subr.bf16.mxu0 0
  %13309 = vmatpush1.bf16.msra.mxu0 %v13285
  %13310 = vmatprep.subr.bf16.mxu0 0
  %13311 = vmatpush1.bf16.msra.mxu0 0
  %13312 = vmatprep.subr.bf16.mxu0 0
  %13313 = vmatpush1.bf16.msra.mxu0 0
  %13314 = vmatprep.subr.bf16.mxu0 0
  %13315 = vmatpush1.bf16.msra.mxu0 0
  %13316 = vmatprep.subr.bf16.mxu0 0
  %13317 = vmatpush1.bf16.msra.mxu0 0
  %13318 = vmatprep.subr.bf16.mxu0 0
  %13319 = vmatpush1.bf16.msra.mxu0 0
  %13320 = vmatprep.subr.bf16.mxu0 0
  %13321 = vmatpush1.bf16.msra.mxu0 0
  %13322 = vmatprep.subr.bf16.mxu0 0
  %13323 = vmatpush1.bf16.msra.mxu0 0
  %13324 = vmatprep.subr.bf16.mxu0 0
  %13325 = vmatpush1.bf16.msra.mxu0 0
  %13326 = vmatprep.mubr.bf16.mxu0 0
  %13327 = vmatmul.mubr.bf16.gmra.mrb[0].mxu0 %v13228
  %v13328 = vpop.f32.mrb[0].mxu0
  %v13329 = vadd.f32 0.0, %v13328
  %v13330 = vpop.f32.mrb[0].mxu0
  %v13331 = vpop.f32.mrb[0].mxu0
  %v13332 = vpop.f32.mrb[0].mxu0
  %13333 = vdwg.mxu0
  %v13334 = vadd.f32 %v13182, %v13329
  %v13335 = vld [vmem:[%s11] sm:$0x1]
  %v13337 = vlaneseq
  %v13338 = vshrl.u32 %v13337, 7
  %v13339 = vsub.s32 0, %v13338
  %v13340 = vrot.slane %v13335, %v13339
  %v13342 = vadd.f32 %v13334, %v13340
  %13343 = vst [vmem:[%s12] sm:$0xff] %v13342
  // Predicated region
  $region50: #{encoder_forward.1} parent=0 // pred_check
    _
  $region51: #{encoder_forward.1} parent=0 // pred_check_branch
    %13345 = sbr.rel (0) target = $region53
  $region52: #{encoder_forward.1} parent=0 // pred_region
    _
  $region53: #{encoder_forward.1} parent=0 // pred_fallthru
    _
  // Predicated region
  $region54: #{encoder_forward.1} parent=0 // pred_check
    _
  $region55: #{encoder_forward.1} parent=0 // pred_check_branch
    %13347 = sbr.rel (0) target = $region57
  $region56: #{encoder_forward.1} parent=0 // pred_region
    _
  $region57: #{encoder_forward.1} parent=0 // pred_fallthru
    _

</llo_original>
